<compile_context>
chip_gen: v7x
topology: tpu7x:2x2x1
jax: 0.10.0
libtpu: 0.0.40
codegen_flags: <defaults>
</compile_context>

<pallas_src>
import collections
import functools

import jax
import jax.numpy as jnp
from jax import lax
from jax.experimental import pallas as pl
from jax.experimental.pallas import tpu as pltpu


# ----------------------------------------------------------------------------
# Small helpers
# ----------------------------------------------------------------------------
def _round_up(v, m):
    return ((v + m - 1) // m) * m


@functools.lru_cache(maxsize=None)
def _multi_tensorcore():
    """True on chips whose megacore can shard a 'parallel' grid axis across >1
    TensorCore (v4 / v5p / v7x); False on single-TC chips (v5e / v6e)."""
    try:
        kind = jax.devices()[0].device_kind.lower()
    except Exception:
        return False
    return any(tag in kind for tag in ("v7", "v4", "v5p"))


def _pick_tm(m):
    """Rows per GEMM tile (multiple of 16 for bf16 sublane packing)."""
    m16 = _round_up(max(m, 1), 16)
    if _multi_tensorcore() and m16 >= 512:
        return _round_up(m16 // 2, 16)    # 2 'parallel' steps for the 2nd TensorCore
    return min(m16, 2048)                 # single-TC: one full-M block (no grid overhead)


# ----------------------------------------------------------------------------
# Pallas kernel: fused GEMM + bias (+ optional ReLU); f32 accumulate, bf16 store
# ----------------------------------------------------------------------------
def _gemm_bias_act_kernel(a_ref, b_ref, bias_ref, o_ref, *, apply_relu):
    acc = jnp.dot(a_ref[...], b_ref[...], preferred_element_type=jnp.float32)
    acc = acc + bias_ref[...]                       # f32 epilogue (v5e friendly)
    if apply_relu:
        acc = jnp.maximum(acc, 0.0)
    o_ref[...] = acc.astype(o_ref.dtype)            # bf16 lane-dense store


def fused_gemm_bias_act(a, b, bias_row, *, relu):
    """a:(M,K) bf16, b:(K,Npad) bf16, bias_row:(1,Npad) f32 -> (M,Npad) bf16.

    Npad must be a multiple of 128 (lane-dense output)."""
    m, k = a.shape
    k2, n_pad = b.shape
    assert k == k2 and n_pad % 128 == 0 and a.dtype == jnp.bfloat16

    tm = _pick_tm(m)
    m_pad = _round_up(m, tm)
    if m_pad != m:
        a = jnp.pad(a, ((0, m_pad - m), (0, 0)))

    flops = 2 * m_pad * k * n_pad
    bytes_accessed = 2 * (m_pad * k + k * n_pad + m_pad * n_pad) + 4 * n_pad
    out = pl.pallas_call(
        functools.partial(_gemm_bias_act_kernel, apply_relu=relu),
        out_shape=jax.ShapeDtypeStruct((m_pad, n_pad), jnp.bfloat16),
        grid=(m_pad // tm,),
        in_specs=[
            pl.BlockSpec((tm, k), lambda i: (i, 0)),      # A tile (K is full dim)
            pl.BlockSpec((k, n_pad), lambda i: (0, 0)),   # full weight, resident
            pl.BlockSpec((1, n_pad), lambda i: (0, 0)),   # bias row
        ],
        out_specs=pl.BlockSpec((tm, n_pad), lambda i: (i, 0)),
        compiler_params=pltpu.CompilerParams(dimension_semantics=("parallel",)),
        cost_estimate=pl.CostEstimate(flops=flops, transcendentals=0,
                                      bytes_accessed=bytes_accessed),
    )(a, b, bias_row)
    return out[:m] if m_pad != m else out


# ----------------------------------------------------------------------------
# Static layer configuration (mirrors the PyTorch Net)
# ----------------------------------------------------------------------------
LayerCfg = collections.namedtuple(
    "LayerCfg", "name transposed cin cout k stride padding output_padding relu")


def net_layer_cfgs(in_channels, out_channels):
    return (
        LayerCfg("conv1", False, in_channels, 32, 3, 2, 1, 0, True),
        LayerCfg("conv2", False, 32, 64, 3, 2, 1, 0, True),
        LayerCfg("conv3", False, 64, 128, 3, 2, 1, 0, True),
        LayerCfg("conv4", True, 128, 64, 3, 3, 2, 0, True),
        LayerCfg("conv5", True, 64, 32, 3, 2, 1, 1, True),
        LayerCfg("conv6", True, 32, out_channels, 3, 2, 1, 1, False),
    )


def _geometry(cfg):
    """Static plan: im2col stride, spatial (lo, hi, interior) pad, K (true/padded), Npad.

    A ConvTranspose3d(k, s, p, op) equals a stride-1 Conv3d over the input dilated
    with (s-1) interior zeros, padded (k-1-p, k-1-p+op), using the flipped kernel."""
    k = cfg.k
    if cfg.transposed:
        lo = k - 1 - cfg.padding
        hi = k - 1 - cfg.padding + cfg.output_padding
        assert lo >= 0 and hi >= 0, "transposed-conv rewrite requires padding <= k-1"
        stride, spatial_pad = 1, (lo, hi, cfg.stride - 1)
    else:
        stride, spatial_pad = cfg.stride, (cfg.padding, cfg.padding, 0)
    kgemm = k * k * k * cfg.cin
    kpad = kgemm if kgemm % 128 == 0 else (64 if kgemm <= 64 else _round_up(kgemm, 128))
    npad = _round_up(cfg.cout, 128)
    return stride, spatial_pad, kgemm, kpad, npad


# ----------------------------------------------------------------------------
# Parameters (PyTorch-style init) and one-time weight prep
# ----------------------------------------------------------------------------
def init_params(key, cfgs):
    params = {}
    for cfg, kk in zip(cfgs, jax.random.split(key, len(cfgs))):
        kw, kb = jax.random.split(kk)
        k3 = cfg.k ** 3
        if cfg.transposed:   # PyTorch ConvTranspose3d: (Cin, Cout, k,k,k); fan_in = Cout*k^3
            shape = (cfg.cin, cfg.cout, cfg.k, cfg.k, cfg.k)
            bound = 1.0 / (cfg.cout * k3) ** 0.5
        else:                # PyTorch Conv3d: (Cout, Cin, k,k,k); fan_in = Cin*k^3
            shape = (cfg.cout, cfg.cin, cfg.k, cfg.k, cfg.k)
            bound = 1.0 / (cfg.cin * k3) ** 0.5
        w = jax.random.uniform(kw, shape, jnp.float32, -bound, bound)
        b = jax.random.uniform(kb, (cfg.cout,), jnp.float32, -bound, bound)
        params[cfg.name] = (w, b)
    return params


def prepare_params(params, cfgs):
    """One-time hoisted layout work: flatten (+ spatial flip for transposed convs),
    zero-pad K and Cout to GEMM-friendly sizes, cast weights to bf16."""
    prep = []
    for cfg in cfgs:
        w, b = params[cfg.name]
        _, _, kgemm, kpad, npad = _geometry(cfg)
        if cfg.transposed:
            # wf[(kd,kh,kw,ci), co] = w[ci, co, k-1-kd, k-1-kh, k-1-kw]
            wf = w[:, :, ::-1, ::-1, ::-1].transpose(2, 3, 4, 0, 1)
        else:
            # wf[(kd,kh,kw,ci), co] = w[co, ci, kd, kh, kw]
            wf = w.transpose(2, 3, 4, 1, 0)
        wf = wf.reshape(kgemm, cfg.cout)
        wf = jnp.pad(wf, ((0, kpad - kgemm), (0, npad - cfg.cout))).astype(jnp.bfloat16)
        bias_row = jnp.pad(b, (0, npad - cfg.cout)).reshape(1, npad).astype(jnp.float32)
        prep.append((wf, bias_row))
    return prep


# ----------------------------------------------------------------------------
# One conv layer (forward or transposed), channels-last, one fused Pallas GEMM
# ----------------------------------------------------------------------------
def conv_layer_ndhwc(x, wf, bias_row, cfg):
    """x: (N, D, H, W, C_stored>=cin) bf16 -> (N, do, ho, wo, Npad) bf16.

    Forward and transposed convs share this path; bias + ReLU always run inside
    the Pallas epilogue, so there is no col2im / scatter-add and no extra passes."""
    k = cfg.k
    stride, (lo, hi, interior), kgemm, kpad, npad = _geometry(cfg)
    n = x.shape[0]
    x = x[..., :cfg.cin]                          # drop zero lane-padding channels
    xp = lax.pad(x, jnp.zeros((), x.dtype),
                 [(0, 0, 0), (lo, hi, interior), (lo, hi, interior),
                  (lo, hi, interior), (0, 0, 0)])
    dp, hp, wp = xp.shape[1:4]
    do = (dp - k) // stride + 1
    ho = (hp - k) // stride + 1
    wo = (wp - k) // stride + 1

    patches = []
    for kd in range(k):
        for kh in range(k):
            for kw in range(k):
                patches.append(xp[:, kd:kd + (do - 1) * stride + 1:stride,
                                     kh:kh + (ho - 1) * stride + 1:stride,
                                     kw:kw + (wo - 1) * stride + 1:stride, :])
    a = jnp.concatenate(patches, axis=-1).reshape(n * do * ho * wo, kgemm)
    if kpad != kgemm:
        a = jnp.pad(a, ((0, 0), (0, kpad - kgemm)))   # clean (16,128) bf16 K tiles

    out = fused_gemm_bias_act(a, wf, bias_row, relu=cfg.relu)
    return out.reshape(n, do, ho, wo, npad)


# ----------------------------------------------------------------------------
# Net forward (NCDHW in / out; NDHWC bf16 internally)
# ----------------------------------------------------------------------------
def net_forward(prep, x, poses, *, cfgs):
    del poses  # only used by Projection (see TODO below)
    x = jnp.transpose(x, (0, 2, 3, 4, 1)).astype(jnp.bfloat16)   # NCDHW -> NDHWC, once
    for (wf, bias_row), cfg in zip(prep, cfgs):
        x = conv_layer_ndhwc(x, wf, bias_row, cfg)
    out_channels = cfgs[-1].cout
    x = x[..., :out_channels].astype(jnp.float32)
    x = jnp.transpose(x, (0, 4, 1, 2, 3))                        # NDHWC -> NCDHW, once
    # TODO(synk): `Projection.apply(x, poses)` is a custom autograd op not defined in
    # the provided module source; no Pallas equivalent can be derived from it.
    proj_imgs = None
    return x, proj_imgs


if __name__ == "__main__":
    key = jax.random.PRNGKey(0)
    kp, kx, kpose = jax.random.split(key, 3)

    in_channels, out_channels = 2, 2
    batch, spatial = 2, 16                         # NCDHW input (2, 2, 16, 16, 16)
    cfgs = net_layer_cfgs(in_channels, out_channels)
    params = init_params(kp, cfgs)
    prep = prepare_params(params, cfgs)

    x = jax.random.normal(kx, (batch, in_channels, spatial, spatial, spatial),
                          jnp.float32)
    poses = jax.random.normal(kpose, (batch, 4, 4), jnp.float32)  # Projection only

    fwd = jax.jit(functools.partial(net_forward, cfgs=cfgs))
    out, proj_imgs = fwd(prep, x, poses)
    out = jax.block_until_ready(out)

    # Shape arithmetic: 16 -> 8 -> 4 -> 2 (encoder), then 2 -> 2 -> 4 -> 8 (decoder).
    assert out.shape == (batch, out_channels, 8, 8, 8), out.shape
    print("KERNEL_OK")
</pallas_src>

<mosaic_0001>
module attributes {stable_mosaic.version = 11 : i64} {
  func.func @_gemm_bias_act_kernel(%arg0: i32, %arg1: memref<1024x64xbf16, #tpu.memory_space<vmem>>, %arg2: memref<64x128xbf16, #tpu.memory_space<vmem>>, %arg3: memref<1x128xf32, #tpu.memory_space<vmem>>, %arg4: memref<1024x128xbf16, #tpu.memory_space<vmem>>) attributes {dimension_semantics = [#tpu.dimension_semantics<parallel>], iteration_bounds = array<i64: 1>, scalar_prefetch = 0 : i64, scratch_operands = 0 : i64, tpu.core_type = #tpu.core_type<tc>, window_params = [{transform_indices = @transform_0, window_bounds = array<i64: 1024, 64>}, {pipeline_mode = #tpu.pipeline_mode<synchronous>, transform_indices = @transform_1, window_bounds = array<i64: 64, 128>}, {pipeline_mode = #tpu.pipeline_mode<synchronous>, transform_indices = @transform_2, window_bounds = array<i64: 1, 128>}, {transform_indices = @transform_3, window_bounds = array<i64: 1024, 128>}]} {
    %c0 = arith.constant 0 : index
    %c0_0 = arith.constant 0 : index
    %0 = vector.load %arg1[%c0, %c0_0] : memref<1024x64xbf16, #tpu.memory_space<vmem>>, vector<1024x64xbf16>
    %c0_1 = arith.constant 0 : index
    %c0_2 = arith.constant 0 : index
    %1 = vector.load %arg2[%c0_1, %c0_2] : memref<64x128xbf16, #tpu.memory_space<vmem>>, vector<64x128xbf16>
    %cst = arith.constant dense<0.000000e+00> : vector<1024x128xf32>
    %2 = tpu.matmul %0, %1, %cst {dimension_numbers = #tpu.dot_dimension_numbers<[1], [0], [0], [1], [0, 0, 1, 1], [], []>} : vector<1024x64xbf16>, vector<64x128xbf16>, vector<1024x128xf32> -> vector<1024x128xf32>
    %c0_3 = arith.constant 0 : index
    %c0_4 = arith.constant 0 : index
    %3 = vector.load %arg3[%c0_3, %c0_4] : memref<1x128xf32, #tpu.memory_space<vmem>>, vector<1x128xf32>
    %4 = vector.broadcast %3 : vector<1x128xf32> to vector<1024x128xf32>
    %5 = arith.addf %2, %4 : vector<1024x128xf32>
    %cst_5 = arith.constant 0.000000e+00 : f32
    %6 = vector.broadcast %cst_5 : f32 to vector<1024x128xf32>
    %7 = arith.maximumf %5, %6 : vector<1024x128xf32>
    %8 = arith.truncf %7 : vector<1024x128xf32> to vector<1024x128xbf16>
    %c0_6 = arith.constant 0 : index
    %c0_7 = arith.constant 0 : index
    %9 = vector.load %arg4[%c0_6, %c0_7] : memref<1024x128xbf16, #tpu.memory_space<vmem>>, vector<1024x128xbf16>
    tpu.vector_store %arg4[%c0_6, %c0_7], %8 {strides = array<i32>} : memref<1024x128xbf16, #tpu.memory_space<vmem>>, vector<1024x128xbf16>,
    return
  }
  func.func @transform_0(%arg0: i32) -> (i32, i32) {
    %c0_i32 = arith.constant 0 : i32
    %c0_i32_0 = arith.constant 0 : i32
    return %arg0, %c0_i32 : i32, i32
  }
  func.func @transform_1(%arg0: i32) -> (i32, i32) {
    %c0_i32 = arith.constant 0 : i32
    %c0_i32_0 = arith.constant 0 : i32
    %c0_i32_1 = arith.constant 0 : i32
    return %c0_i32, %c0_i32_0 : i32, i32
  }
  func.func @transform_2(%arg0: i32) -> (i32, i32) {
    %c0_i32 = arith.constant 0 : i32
    %c0_i32_0 = arith.constant 0 : i32
    %c0_i32_1 = arith.constant 0 : i32
    return %c0_i32, %c0_i32_0 : i32, i32
  }
  func.func @transform_3(%arg0: i32) -> (i32, i32) {
    %c0_i32 = arith.constant 0 : i32
    %c0_i32_0 = arith.constant 0 : i32
    return %arg0, %c0_i32 : i32, i32
  }
}

module attributes {stable_mosaic.version = 11 : i64} {
  func.func @_gemm_bias_act_kernel(%arg0: i32, %arg1: memref<128x896xbf16, #tpu.memory_space<vmem>>, %arg2: memref<896x128xbf16, #tpu.memory_space<vmem>>, %arg3: memref<1x128xf32, #tpu.memory_space<vmem>>, %arg4: memref<128x128xbf16, #tpu.memory_space<vmem>>) attributes {dimension_semantics = [#tpu.dimension_semantics<parallel>], iteration_bounds = array<i64: 1>, scalar_prefetch = 0 : i64, scratch_operands = 0 : i64, tpu.core_type = #tpu.core_type<tc>, window_params = [{transform_indices = @transform_0, window_bounds = array<i64: 128, 896>}, {pipeline_mode = #tpu.pipeline_mode<synchronous>, transform_indices = @transform_1, window_bounds = array<i64: 896, 128>}, {pipeline_mode = #tpu.pipeline_mode<synchronous>, transform_indices = @transform_2, window_bounds = array<i64: 1, 128>}, {transform_indices = @transform_3, window_bounds = array<i64: 128, 128>}]} {
    %c0 = arith.constant 0 : index
    %c0_0 = arith.constant 0 : index
    %0 = vector.load %arg1[%c0, %c0_0] : memref<128x896xbf16, #tpu.memory_space<vmem>>, vector<128x896xbf16>
    %c0_1 = arith.constant 0 : index
    %c0_2 = arith.constant 0 : index
    %1 = vector.load %arg2[%c0_1, %c0_2] : memref<896x128xbf16, #tpu.memory_space<vmem>>, vector<896x128xbf16>
    %cst = arith.constant dense<0.000000e+00> : vector<128x128xf32>
    %2 = tpu.matmul %0, %1, %cst {dimension_numbers = #tpu.dot_dimension_numbers<[1], [0], [0], [1], [0, 0, 1, 1], [], []>} : vector<128x896xbf16>, vector<896x128xbf16>, vector<128x128xf32> -> vector<128x128xf32>
    %c0_3 = arith.constant 0 : index
    %c0_4 = arith.constant 0 : index
    %3 = vector.load %arg3[%c0_3, %c0_4] : memref<1x128xf32, #tpu.memory_space<vmem>>, vector<1x128xf32>
    %4 = vector.broadcast %3 : vector<1x128xf32> to vector<128x128xf32>
    %5 = arith.addf %2, %4 : vector<128x128xf32>
    %cst_5 = arith.constant 0.000000e+00 : f32
    %6 = vector.broadcast %cst_5 : f32 to vector<128x128xf32>
    %7 = arith.maximumf %5, %6 : vector<128x128xf32>
    %8 = arith.truncf %7 : vector<128x128xf32> to vector<128x128xbf16>
    %c0_6 = arith.constant 0 : index
    %c0_7 = arith.constant 0 : index
    %9 = vector.load %arg4[%c0_6, %c0_7] : memref<128x128xbf16, #tpu.memory_space<vmem>>, vector<128x128xbf16>
    tpu.vector_store %arg4[%c0_6, %c0_7], %8 {strides = array<i32>} : memref<128x128xbf16, #tpu.memory_space<vmem>>, vector<128x128xbf16>,
    return
  }
  func.func @transform_0(%arg0: i32) -> (i32, i32) {
    %c0_i32 = arith.constant 0 : i32
    %c0_i32_0 = arith.constant 0 : i32
    return %arg0, %c0_i32 : i32, i32
  }
  func.func @transform_1(%arg0: i32) -> (i32, i32) {
    %c0_i32 = arith.constant 0 : i32
    %c0_i32_0 = arith.constant 0 : i32
    %c0_i32_1 = arith.constant 0 : i32
    return %c0_i32, %c0_i32_0 : i32, i32
  }
  func.func @transform_2(%arg0: i32) -> (i32, i32) {
    %c0_i32 = arith.constant 0 : i32
    %c0_i32_0 = arith.constant 0 : i32
    %c0_i32_1 = arith.constant 0 : i32
    return %c0_i32, %c0_i32_0 : i32, i32
  }
  func.func @transform_3(%arg0: i32) -> (i32, i32) {
    %c0_i32 = arith.constant 0 : i32
    %c0_i32_0 = arith.constant 0 : i32
    return %arg0, %c0_i32 : i32, i32
  }
}

module attributes {stable_mosaic.version = 11 : i64} {
  func.func @_gemm_bias_act_kernel(%arg0: i32, %arg1: memref<16x1792xbf16, #tpu.memory_space<vmem>>, %arg2: memref<1792x128xbf16, #tpu.memory_space<vmem>>, %arg3: memref<1x128xf32, #tpu.memory_space<vmem>>, %arg4: memref<16x128xbf16, #tpu.memory_space<vmem>>) attributes {dimension_semantics = [#tpu.dimension_semantics<parallel>], iteration_bounds = array<i64: 1>, scalar_prefetch = 0 : i64, scratch_operands = 0 : i64, tpu.core_type = #tpu.core_type<tc>, window_params = [{transform_indices = @transform_0, window_bounds = array<i64: 16, 1792>}, {pipeline_mode = #tpu.pipeline_mode<synchronous>, transform_indices = @transform_1, window_bounds = array<i64: 1792, 128>}, {pipeline_mode = #tpu.pipeline_mode<synchronous>, transform_indices = @transform_2, window_bounds = array<i64: 1, 128>}, {transform_indices = @transform_3, window_bounds = array<i64: 16, 128>}]} {
    %c0 = arith.constant 0 : index
    %c0_0 = arith.constant 0 : index
    %0 = vector.load %arg1[%c0, %c0_0] : memref<16x1792xbf16, #tpu.memory_space<vmem>>, vector<16x1792xbf16>
    %c0_1 = arith.constant 0 : index
    %c0_2 = arith.constant 0 : index
    %1 = vector.load %arg2[%c0_1, %c0_2] : memref<1792x128xbf16, #tpu.memory_space<vmem>>, vector<1792x128xbf16>
    %cst = arith.constant dense<0.000000e+00> : vector<16x128xf32>
    %2 = tpu.matmul %0, %1, %cst {dimension_numbers = #tpu.dot_dimension_numbers<[1], [0], [0], [1], [0, 0, 1, 1], [], []>} : vector<16x1792xbf16>, vector<1792x128xbf16>, vector<16x128xf32> -> vector<16x128xf32>
    %c0_3 = arith.constant 0 : index
    %c0_4 = arith.constant 0 : index
    %3 = vector.load %arg3[%c0_3, %c0_4] : memref<1x128xf32, #tpu.memory_space<vmem>>, vector<1x128xf32>
    %4 = vector.broadcast %3 : vector<1x128xf32> to vector<16x128xf32>
    %5 = arith.addf %2, %4 : vector<16x128xf32>
    %cst_5 = arith.constant 0.000000e+00 : f32
    %6 = vector.broadcast %cst_5 : f32 to vector<16x128xf32>
    %7 = arith.maximumf %5, %6 : vector<16x128xf32>
    %8 = arith.truncf %7 : vector<16x128xf32> to vector<16x128xbf16>
    %c0_6 = arith.constant 0 : index
    %c0_7 = arith.constant 0 : index
    %9 = vector.load %arg4[%c0_6, %c0_7] : memref<16x128xbf16, #tpu.memory_space<vmem>>, vector<16x128xbf16>
    tpu.vector_store %arg4[%c0_6, %c0_7], %8 {strides = array<i32>} : memref<16x128xbf16, #tpu.memory_space<vmem>>, vector<16x128xbf16>,
    return
  }
  func.func @transform_0(%arg0: i32) -> (i32, i32) {
    %c0_i32 = arith.constant 0 : i32
    %c0_i32_0 = arith.constant 0 : i32
    return %arg0, %c0_i32 : i32, i32
  }
  func.func @transform_1(%arg0: i32) -> (i32, i32) {
    %c0_i32 = arith.constant 0 : i32
    %c0_i32_0 = arith.constant 0 : i32
    %c0_i32_1 = arith.constant 0 : i32
    return %c0_i32, %c0_i32_0 : i32, i32
  }
  func.func @transform_2(%arg0: i32) -> (i32, i32) {
    %c0_i32 = arith.constant 0 : i32
    %c0_i32_0 = arith.constant 0 : i32
    %c0_i32_1 = arith.constant 0 : i32
    return %c0_i32, %c0_i32_0 : i32, i32
  }
  func.func @transform_3(%arg0: i32) -> (i32, i32) {
    %c0_i32 = arith.constant 0 : i32
    %c0_i32_0 = arith.constant 0 : i32
    return %arg0, %c0_i32 : i32, i32
  }
}

module attributes {stable_mosaic.version = 11 : i64} {
  func.func @_gemm_bias_act_kernel(%arg0: i32, %arg1: memref<16x3456xbf16, #tpu.memory_space<vmem>>, %arg2: memref<3456x128xbf16, #tpu.memory_space<vmem>>, %arg3: memref<1x128xf32, #tpu.memory_space<vmem>>, %arg4: memref<16x128xbf16, #tpu.memory_space<vmem>>) attributes {dimension_semantics = [#tpu.dimension_semantics<parallel>], iteration_bounds = array<i64: 1>, scalar_prefetch = 0 : i64, scratch_operands = 0 : i64, tpu.core_type = #tpu.core_type<tc>, window_params = [{transform_indices = @transform_0, window_bounds = array<i64: 16, 3456>}, {pipeline_mode = #tpu.pipeline_mode<synchronous>, transform_indices = @transform_1, window_bounds = array<i64: 3456, 128>}, {pipeline_mode = #tpu.pipeline_mode<synchronous>, transform_indices = @transform_2, window_bounds = array<i64: 1, 128>}, {transform_indices = @transform_3, window_bounds = array<i64: 16, 128>}]} {
    %c0 = arith.constant 0 : index
    %c0_0 = arith.constant 0 : index
    %0 = vector.load %arg1[%c0, %c0_0] : memref<16x3456xbf16, #tpu.memory_space<vmem>>, vector<16x3456xbf16>
    %c0_1 = arith.constant 0 : index
    %c0_2 = arith.constant 0 : index
    %1 = vector.load %arg2[%c0_1, %c0_2] : memref<3456x128xbf16, #tpu.memory_space<vmem>>, vector<3456x128xbf16>
    %cst = arith.constant dense<0.000000e+00> : vector<16x128xf32>
    %2 = tpu.matmul %0, %1, %cst {dimension_numbers = #tpu.dot_dimension_numbers<[1], [0], [0], [1], [0, 0, 1, 1], [], []>} : vector<16x3456xbf16>, vector<3456x128xbf16>, vector<16x128xf32> -> vector<16x128xf32>
    %c0_3 = arith.constant 0 : index
    %c0_4 = arith.constant 0 : index
    %3 = vector.load %arg3[%c0_3, %c0_4] : memref<1x128xf32, #tpu.memory_space<vmem>>, vector<1x128xf32>
    %4 = vector.broadcast %3 : vector<1x128xf32> to vector<16x128xf32>
    %5 = arith.addf %2, %4 : vector<16x128xf32>
    %cst_5 = arith.constant 0.000000e+00 : f32
    %6 = vector.broadcast %cst_5 : f32 to vector<16x128xf32>
    %7 = arith.maximumf %5, %6 : vector<16x128xf32>
    %8 = arith.truncf %7 : vector<16x128xf32> to vector<16x128xbf16>
    %c0_6 = arith.constant 0 : index
    %c0_7 = arith.constant 0 : index
    %9 = vector.load %arg4[%c0_6, %c0_7] : memref<16x128xbf16, #tpu.memory_space<vmem>>, vector<16x128xbf16>
    tpu.vector_store %arg4[%c0_6, %c0_7], %8 {strides = array<i32>} : memref<16x128xbf16, #tpu.memory_space<vmem>>, vector<16x128xbf16>,
    return
  }
  func.func @transform_0(%arg0: i32) -> (i32, i32) {
    %c0_i32 = arith.constant 0 : i32
    %c0_i32_0 = arith.constant 0 : i32
    return %arg0, %c0_i32 : i32, i32
  }
  func.func @transform_1(%arg0: i32) -> (i32, i32) {
    %c0_i32 = arith.constant 0 : i32
    %c0_i32_0 = arith.constant 0 : i32
    %c0_i32_1 = arith.constant 0 : i32
    return %c0_i32, %c0_i32_0 : i32, i32
  }
  func.func @transform_2(%arg0: i32) -> (i32, i32) {
    %c0_i32 = arith.constant 0 : i32
    %c0_i32_0 = arith.constant 0 : i32
    %c0_i32_1 = arith.constant 0 : i32
    return %c0_i32, %c0_i32_0 : i32, i32
  }
  func.func @transform_3(%arg0: i32) -> (i32, i32) {
    %c0_i32 = arith.constant 0 : i32
    %c0_i32_0 = arith.constant 0 : i32
    return %arg0, %c0_i32 : i32, i32
  }
}

module attributes {stable_mosaic.version = 11 : i64} {
  func.func @_gemm_bias_act_kernel(%arg0: i32, %arg1: memref<128x1792xbf16, #tpu.memory_space<vmem>>, %arg2: memref<1792x128xbf16, #tpu.memory_space<vmem>>, %arg3: memref<1x128xf32, #tpu.memory_space<vmem>>, %arg4: memref<128x128xbf16, #tpu.memory_space<vmem>>) attributes {dimension_semantics = [#tpu.dimension_semantics<parallel>], iteration_bounds = array<i64: 1>, scalar_prefetch = 0 : i64, scratch_operands = 0 : i64, tpu.core_type = #tpu.core_type<tc>, window_params = [{transform_indices = @transform_0, window_bounds = array<i64: 128, 1792>}, {pipeline_mode = #tpu.pipeline_mode<synchronous>, transform_indices = @transform_1, window_bounds = array<i64: 1792, 128>}, {pipeline_mode = #tpu.pipeline_mode<synchronous>, transform_indices = @transform_2, window_bounds = array<i64: 1, 128>}, {transform_indices = @transform_3, window_bounds = array<i64: 128, 128>}]} {
    %c0 = arith.constant 0 : index
    %c0_0 = arith.constant 0 : index
    %0 = vector.load %arg1[%c0, %c0_0] : memref<128x1792xbf16, #tpu.memory_space<vmem>>, vector<128x1792xbf16>
    %c0_1 = arith.constant 0 : index
    %c0_2 = arith.constant 0 : index
    %1 = vector.load %arg2[%c0_1, %c0_2] : memref<1792x128xbf16, #tpu.memory_space<vmem>>, vector<1792x128xbf16>
    %cst = arith.constant dense<0.000000e+00> : vector<128x128xf32>
    %2 = tpu.matmul %0, %1, %cst {dimension_numbers = #tpu.dot_dimension_numbers<[1], [0], [0], [1], [0, 0, 1, 1], [], []>} : vector<128x1792xbf16>, vector<1792x128xbf16>, vector<128x128xf32> -> vector<128x128xf32>
    %c0_3 = arith.constant 0 : index
    %c0_4 = arith.constant 0 : index
    %3 = vector.load %arg3[%c0_3, %c0_4] : memref<1x128xf32, #tpu.memory_space<vmem>>, vector<1x128xf32>
    %4 = vector.broadcast %3 : vector<1x128xf32> to vector<128x128xf32>
    %5 = arith.addf %2, %4 : vector<128x128xf32>
    %cst_5 = arith.constant 0.000000e+00 : f32
    %6 = vector.broadcast %cst_5 : f32 to vector<128x128xf32>
    %7 = arith.maximumf %5, %6 : vector<128x128xf32>
    %8 = arith.truncf %7 : vector<128x128xf32> to vector<128x128xbf16>
    %c0_6 = arith.constant 0 : index
    %c0_7 = arith.constant 0 : index
    %9 = vector.load %arg4[%c0_6, %c0_7] : memref<128x128xbf16, #tpu.memory_space<vmem>>, vector<128x128xbf16>
    tpu.vector_store %arg4[%c0_6, %c0_7], %8 {strides = array<i32>} : memref<128x128xbf16, #tpu.memory_space<vmem>>, vector<128x128xbf16>,
    return
  }
  func.func @transform_0(%arg0: i32) -> (i32, i32) {
    %c0_i32 = arith.constant 0 : i32
    %c0_i32_0 = arith.constant 0 : i32
    return %arg0, %c0_i32 : i32, i32
  }
  func.func @transform_1(%arg0: i32) -> (i32, i32) {
    %c0_i32 = arith.constant 0 : i32
    %c0_i32_0 = arith.constant 0 : i32
    %c0_i32_1 = arith.constant 0 : i32
    return %c0_i32, %c0_i32_0 : i32, i32
  }
  func.func @transform_2(%arg0: i32) -> (i32, i32) {
    %c0_i32 = arith.constant 0 : i32
    %c0_i32_0 = arith.constant 0 : i32
    %c0_i32_1 = arith.constant 0 : i32
    return %c0_i32, %c0_i32_0 : i32, i32
  }
  func.func @transform_3(%arg0: i32) -> (i32, i32) {
    %c0_i32 = arith.constant 0 : i32
    %c0_i32_0 = arith.constant 0 : i32
    return %arg0, %c0_i32 : i32, i32
  }
}

module attributes {stable_mosaic.version = 11 : i64} {
  func.func @_gemm_bias_act_kernel(%arg0: i32, %arg1: memref<1024x896xbf16, #tpu.memory_space<vmem>>, %arg2: memref<896x128xbf16, #tpu.memory_space<vmem>>, %arg3: memref<1x128xf32, #tpu.memory_space<vmem>>, %arg4: memref<1024x128xbf16, #tpu.memory_space<vmem>>) attributes {dimension_semantics = [#tpu.dimension_semantics<parallel>], iteration_bounds = array<i64: 1>, scalar_prefetch = 0 : i64, scratch_operands = 0 : i64, tpu.core_type = #tpu.core_type<tc>, window_params = [{transform_indices = @transform_0, window_bounds = array<i64: 1024, 896>}, {pipeline_mode = #tpu.pipeline_mode<synchronous>, transform_indices = @transform_1, window_bounds = array<i64: 896, 128>}, {pipeline_mode = #tpu.pipeline_mode<synchronous>, transform_indices = @transform_2, window_bounds = array<i64: 1, 128>}, {transform_indices = @transform_3, window_bounds = array<i64: 1024, 128>}]} {
    %c0 = arith.constant 0 : index
    %c0_0 = arith.constant 0 : index
    %0 = vector.load %arg1[%c0, %c0_0] : memref<1024x896xbf16, #tpu.memory_space<vmem>>, vector<1024x896xbf16>
    %c0_1 = arith.constant 0 : index
    %c0_2 = arith.constant 0 : index
    %1 = vector.load %arg2[%c0_1, %c0_2] : memref<896x128xbf16, #tpu.memory_space<vmem>>, vector<896x128xbf16>
    %cst = arith.constant dense<0.000000e+00> : vector<1024x128xf32>
    %2 = tpu.matmul %0, %1, %cst {dimension_numbers = #tpu.dot_dimension_numbers<[1], [0], [0], [1], [0, 0, 1, 1], [], []>} : vector<1024x896xbf16>, vector<896x128xbf16>, vector<1024x128xf32> -> vector<1024x128xf32>
    %c0_3 = arith.constant 0 : index
    %c0_4 = arith.constant 0 : index
    %3 = vector.load %arg3[%c0_3, %c0_4] : memref<1x128xf32, #tpu.memory_space<vmem>>, vector<1x128xf32>
    %4 = vector.broadcast %3 : vector<1x128xf32> to vector<1024x128xf32>
    %5 = arith.addf %2, %4 : vector<1024x128xf32>
    %6 = arith.truncf %5 : vector<1024x128xf32> to vector<1024x128xbf16>
    %c0_5 = arith.constant 0 : index
    %c0_6 = arith.constant 0 : index
    %7 = vector.load %arg4[%c0_5, %c0_6] : memref<1024x128xbf16, #tpu.memory_space<vmem>>, vector<1024x128xbf16>
    tpu.vector_store %arg4[%c0_5, %c0_6], %6 {strides = array<i32>} : memref<1024x128xbf16, #tpu.memory_space<vmem>>, vector<1024x128xbf16>,
    return
  }
  func.func @transform_0(%arg0: i32) -> (i32, i32) {
    %c0_i32 = arith.constant 0 : i32
    %c0_i32_0 = arith.constant 0 : i32
    return %arg0, %c0_i32 : i32, i32
  }
  func.func @transform_1(%arg0: i32) -> (i32, i32) {
    %c0_i32 = arith.constant 0 : i32
    %c0_i32_0 = arith.constant 0 : i32
    %c0_i32_1 = arith.constant 0 : i32
    return %c0_i32, %c0_i32_0 : i32, i32
  }
  func.func @transform_2(%arg0: i32) -> (i32, i32) {
    %c0_i32 = arith.constant 0 : i32
    %c0_i32_0 = arith.constant 0 : i32
    %c0_i32_1 = arith.constant 0 : i32
    return %c0_i32, %c0_i32_0 : i32, i32
  }
  func.func @transform_3(%arg0: i32) -> (i32, i32) {
    %c0_i32 = arith.constant 0 : i32
    %c0_i32_0 = arith.constant 0 : i32
    return %arg0, %c0_i32 : i32, i32
  }
}

</mosaic_0001>

<llo_original>
// kernel: net_forward.6
$region0: #{net_forward.6}
  #allocation0 [shape = 'u32[]', space=smem, size = 0x4, offset = 0x4, fixed_abs, tag = 'smem constant byte address 0x4 - core index']
  #allocation1 [shape = 'u32[144,128]{1,0:T(1,128)}', space=vmem, size = 0x12000, scoped, tag = 'internal scratch']
  %s0 = inlined_call_operand.vmem [shape: bf16[1024,64], index: 0, kind: input, shape index: {}]
  %s1 = inlined_call_operand.vmem [shape: bf16[64,128], index: 1, kind: input, shape index: {}]
  %s2 = inlined_call_operand.vmem [shape: f32[1,128], index: 2, kind: input, shape index: {}]
  %s3 = inlined_call_operand.vmem [shape: bf16[1024,128], index: 3, kind: output, shape index: {}]
  %s4 = sld [smem:[#allocation0]]
  $region22: #{net_forward.6} parent=0
    _
  %s6 = ssub.s32 1, %s4
  %s7 = scalar_select 0, %s6, %s4
  // Predicated region
  $region2: #{net_forward.6} parent=0 // pred_check
    _
  $region3: #{net_forward.6} parent=0 // pred_check_branch
    %9 = sbr.rel (0) target = $region5
  $region4: #{net_forward.6} parent=0 // pred_region
    _
  $region5: #{net_forward.6} parent=0 // pred_fallthru
    _
  // Predicated region
  $region6: #{net_forward.6} parent=0 // pred_check
    _
  $region7: #{net_forward.6} parent=0 // pred_check_branch
    %11 = sbr.rel (0) target = $region9
  $region8: #{net_forward.6} parent=0 // pred_region
    _
  $region9: #{net_forward.6} parent=0 // pred_fallthru
    _
  // Predicated region
  $region10: #{net_forward.6} parent=0 // pred_check
    _
  $region11: #{net_forward.6} parent=0 // pred_check_branch
    %13 = sbr.rel (0) target = $region13
  $region12: #{net_forward.6} parent=0 // pred_region
    _
  $region13: #{net_forward.6} parent=0 // pred_fallthru
    _
  %v15 = vld [vmem:[%s0] sm:$0xf]
  %v16 = vld [vmem:[%s0 + $0x4] sm:$0xf]
  %v17 = vld [vmem:[%s0 + $0x8] sm:$0xf]
  %v18 = vld [vmem:[%s0 + $0xc] sm:$0xf]
  %v19 = vld [vmem:[%s0 + $0x10] sm:$0xf]
  %v20 = vld [vmem:[%s0 + $0x14] sm:$0xf]
  %v21 = vld [vmem:[%s0 + $0x18] sm:$0xf]
  %v22 = vld [vmem:[%s0 + $0x1c] sm:$0xf]
  %v23 = vld [vmem:[%s0 + $0x20] sm:$0xf]
  %v24 = vld [vmem:[%s0 + $0x24] sm:$0xf]
  %v25 = vld [vmem:[%s0 + $0x28] sm:$0xf]
  %v26 = vld [vmem:[%s0 + $0x2c] sm:$0xf]
  %v27 = vld [vmem:[%s0 + $0x30] sm:$0xf]
  %v28 = vld [vmem:[%s0 + $0x34] sm:$0xf]
  %v29 = vld [vmem:[%s0 + $0x38] sm:$0xf]
  %v30 = vld [vmem:[%s0 + $0x3c] sm:$0xf]
  %v31 = vld [vmem:[%s0 + $0x40] sm:$0xf]
  %v32 = vld [vmem:[%s0 + $0x44] sm:$0xf]
  %v33 = vld [vmem:[%s0 + $0x48] sm:$0xf]
  %v34 = vld [vmem:[%s0 + $0x4c] sm:$0xf]
  %v35 = vld [vmem:[%s0 + $0x50] sm:$0xf]
  %v36 = vld [vmem:[%s0 + $0x54] sm:$0xf]
  %v37 = vld [vmem:[%s0 + $0x58] sm:$0xf]
  %v38 = vld [vmem:[%s0 + $0x5c] sm:$0xf]
  %v39 = vld [vmem:[%s0 + $0x60] sm:$0xf]
  %v40 = vld [vmem:[%s0 + $0x64] sm:$0xf]
  %v41 = vld [vmem:[%s0 + $0x68] sm:$0xf]
  %v42 = vld [vmem:[%s0 + $0x6c] sm:$0xf]
  %v43 = vld [vmem:[%s0 + $0x70] sm:$0xf]
  %v44 = vld [vmem:[%s0 + $0x74] sm:$0xf]
  %v45 = vld [vmem:[%s0 + $0x78] sm:$0xf]
  %v46 = vld [vmem:[%s0 + $0x7c] sm:$0xf]
  %v47 = vld [vmem:[%s0 + $0x80] sm:$0xf]
  %v48 = vld [vmem:[%s0 + $0x84] sm:$0xf]
  %v49 = vld [vmem:[%s0 + $0x88] sm:$0xf]
  %v50 = vld [vmem:[%s0 + $0x8c] sm:$0xf]
  %v51 = vld [vmem:[%s0 + $0x90] sm:$0xf]
  %v52 = vld [vmem:[%s0 + $0x94] sm:$0xf]
  %v53 = vld [vmem:[%s0 + $0x98] sm:$0xf]
  %v54 = vld [vmem:[%s0 + $0x9c] sm:$0xf]
  %v55 = vld [vmem:[%s0 + $0xa0] sm:$0xf]
  %v56 = vld [vmem:[%s0 + $0xa4] sm:$0xf]
  %v57 = vld [vmem:[%s0 + $0xa8] sm:$0xf]
  %v58 = vld [vmem:[%s0 + $0xac] sm:$0xf]
  %v59 = vld [vmem:[%s0 + $0xb0] sm:$0xf]
  %v60 = vld [vmem:[%s0 + $0xb4] sm:$0xf]
  %v61 = vld [vmem:[%s0 + $0xb8] sm:$0xf]
  %v62 = vld [vmem:[%s0 + $0xbc] sm:$0xf]
  %v63 = vld [vmem:[%s0 + $0xc0] sm:$0xf]
  %v64 = vld [vmem:[%s0 + $0xc4] sm:$0xf]
  %v65 = vld [vmem:[%s0 + $0xc8] sm:$0xf]
  %v66 = vld [vmem:[%s0 + $0xcc] sm:$0xf]
  %v67 = vld [vmem:[%s0 + $0xd0] sm:$0xf]
  %v68 = vld [vmem:[%s0 + $0xd4] sm:$0xf]
  %v69 = vld [vmem:[%s0 + $0xd8] sm:$0xf]
  %v70 = vld [vmem:[%s0 + $0xdc] sm:$0xf]
  %v71 = vld [vmem:[%s0 + $0xe0] sm:$0xf]
  %v72 = vld [vmem:[%s0 + $0xe4] sm:$0xf]
  %v73 = vld [vmem:[%s0 + $0xe8] sm:$0xf]
  %v74 = vld [vmem:[%s0 + $0xec] sm:$0xf]
  %v75 = vld [vmem:[%s0 + $0xf0] sm:$0xf]
  %v76 = vld [vmem:[%s0 + $0xf4] sm:$0xf]
  %v77 = vld [vmem:[%s0 + $0xf8] sm:$0xf]
  %v78 = vld [vmem:[%s0 + $0xfc] sm:$0xf]
  %v79 = vld [vmem:[%s0 + $0x100] sm:$0xf]
  %v80 = vld [vmem:[%s0 + $0x104] sm:$0xf]
  %v81 = vld [vmem:[%s0 + $0x108] sm:$0xf]
  %v82 = vld [vmem:[%s0 + $0x10c] sm:$0xf]
  %v83 = vld [vmem:[%s0 + $0x110] sm:$0xf]
  %v84 = vld [vmem:[%s0 + $0x114] sm:$0xf]
  %v85 = vld [vmem:[%s0 + $0x118] sm:$0xf]
  %v86 = vld [vmem:[%s0 + $0x11c] sm:$0xf]
  %v87 = vld [vmem:[%s0 + $0x120] sm:$0xf]
  %v88 = vld [vmem:[%s0 + $0x124] sm:$0xf]
  %v89 = vld [vmem:[%s0 + $0x128] sm:$0xf]
  %v90 = vld [vmem:[%s0 + $0x12c] sm:$0xf]
  %v91 = vld [vmem:[%s0 + $0x130] sm:$0xf]
  %v92 = vld [vmem:[%s0 + $0x134] sm:$0xf]
  %v93 = vld [vmem:[%s0 + $0x138] sm:$0xf]
  %v94 = vld [vmem:[%s0 + $0x13c] sm:$0xf]
  %v95 = vld [vmem:[%s0 + $0x140] sm:$0xf]
  %v96 = vld [vmem:[%s0 + $0x144] sm:$0xf]
  %v97 = vld [vmem:[%s0 + $0x148] sm:$0xf]
  %v98 = vld [vmem:[%s0 + $0x14c] sm:$0xf]
  %v99 = vld [vmem:[%s0 + $0x150] sm:$0xf]
  %v100 = vld [vmem:[%s0 + $0x154] sm:$0xf]
  %v101 = vld [vmem:[%s0 + $0x158] sm:$0xf]
  %v102 = vld [vmem:[%s0 + $0x15c] sm:$0xf]
  %v103 = vld [vmem:[%s0 + $0x160] sm:$0xf]
  %v104 = vld [vmem:[%s0 + $0x164] sm:$0xf]
  %v105 = vld [vmem:[%s0 + $0x168] sm:$0xf]
  %v106 = vld [vmem:[%s0 + $0x16c] sm:$0xf]
  %v107 = vld [vmem:[%s0 + $0x170] sm:$0xf]
  %v108 = vld [vmem:[%s0 + $0x174] sm:$0xf]
  %v109 = vld [vmem:[%s0 + $0x178] sm:$0xf]
  %v110 = vld [vmem:[%s0 + $0x17c] sm:$0xf]
  %v111 = vld [vmem:[%s0 + $0x180] sm:$0xf]
  %v112 = vld [vmem:[%s0 + $0x184] sm:$0xf]
  %v113 = vld [vmem:[%s0 + $0x188] sm:$0xf]
  %v114 = vld [vmem:[%s0 + $0x18c] sm:$0xf]
  %v115 = vld [vmem:[%s0 + $0x190] sm:$0xf]
  %v116 = vld [vmem:[%s0 + $0x194] sm:$0xf]
  %v117 = vld [vmem:[%s0 + $0x198] sm:$0xf]
  %v118 = vld [vmem:[%s0 + $0x19c] sm:$0xf]
  %v119 = vld [vmem:[%s0 + $0x1a0] sm:$0xf]
  %v120 = vld [vmem:[%s0 + $0x1a4] sm:$0xf]
  %v121 = vld [vmem:[%s0 + $0x1a8] sm:$0xf]
  %v122 = vld [vmem:[%s0 + $0x1ac] sm:$0xf]
  %v123 = vld [vmem:[%s0 + $0x1b0] sm:$0xf]
  %v124 = vld [vmem:[%s0 + $0x1b4] sm:$0xf]
  %v125 = vld [vmem:[%s0 + $0x1b8] sm:$0xf]
  %v126 = vld [vmem:[%s0 + $0x1bc] sm:$0xf]
  %v127 = vld [vmem:[%s0 + $0x1c0] sm:$0xf]
  %v128 = vld [vmem:[%s0 + $0x1c4] sm:$0xf]
  %v129 = vld [vmem:[%s0 + $0x1c8] sm:$0xf]
  %v130 = vld [vmem:[%s0 + $0x1cc] sm:$0xf]
  %v131 = vld [vmem:[%s0 + $0x1d0] sm:$0xf]
  %v132 = vld [vmem:[%s0 + $0x1d4] sm:$0xf]
  %v133 = vld [vmem:[%s0 + $0x1d8] sm:$0xf]
  %v134 = vld [vmem:[%s0 + $0x1dc] sm:$0xf]
  %v135 = vld [vmem:[%s0 + $0x1e0] sm:$0xf]
  %v136 = vld [vmem:[%s0 + $0x1e4] sm:$0xf]
  %v137 = vld [vmem:[%s0 + $0x1e8] sm:$0xf]
  %v138 = vld [vmem:[%s0 + $0x1ec] sm:$0xf]
  %v139 = vld [vmem:[%s0 + $0x1f0] sm:$0xf]
  %v140 = vld [vmem:[%s0 + $0x1f4] sm:$0xf]
  %v141 = vld [vmem:[%s0 + $0x1f8] sm:$0xf]
  %v142 = vld [vmem:[%s0 + $0x1fc] sm:$0xf]
  %v143 = vld [vmem:[%s1] sm:$0xf]
  %v144 = vld [vmem:[%s1 + $0x4] sm:$0xf]
  %v145 = vld [vmem:[%s1 + $0x8] sm:$0xf]
  %v146 = vld [vmem:[%s1 + $0xc] sm:$0xf]
  %v147 = vld [vmem:[%s1 + $0x10] sm:$0xf]
  %v148 = vld [vmem:[%s1 + $0x14] sm:$0xf]
  %v149 = vld [vmem:[%s1 + $0x18] sm:$0xf]
  %v150 = vld [vmem:[%s1 + $0x1c] sm:$0xf]
  %v151 = vld [vmem:[%s2] sm:$0x1]
  %v153 = vlaneseq
  %v154 = vshrl.u32 %v153, 7
  %v155 = vsub.s32 0, %v154
  %v156 = vrot.slane %v151, %v155
  %v286 = vunpack.c.l.b16 %v15
  %v287 = vunpack.c.l.b16 %v16
  %v288 = vunpack.c.l.b16 %v17
  %v289 = vunpack.c.l.b16 %v18
  %v290 = vunpack.c.l.b16 %v19
  %v291 = vunpack.c.l.b16 %v20
  %v292 = vunpack.c.l.b16 %v21
  %v293 = vunpack.c.l.b16 %v22
  %v294 = vunpack.c.l.b16 %v23
  %v295 = vunpack.c.l.b16 %v24
  %v296 = vunpack.c.l.b16 %v25
  %v297 = vunpack.c.l.b16 %v26
  %v298 = vunpack.c.l.b16 %v27
  %v299 = vunpack.c.l.b16 %v28
  %v300 = vunpack.c.l.b16 %v29
  %v301 = vunpack.c.l.b16 %v30
  %v302 = vunpack.c.l.b16 %v31
  %v303 = vunpack.c.l.b16 %v32
  %v304 = vunpack.c.l.b16 %v33
  %v305 = vunpack.c.l.b16 %v34
  %v306 = vunpack.c.l.b16 %v35
  %v307 = vunpack.c.l.b16 %v36
  %v308 = vunpack.c.l.b16 %v37
  %v309 = vunpack.c.l.b16 %v38
  %v310 = vunpack.c.l.b16 %v39
  %v311 = vunpack.c.l.b16 %v40
  %v312 = vunpack.c.l.b16 %v41
  %v313 = vunpack.c.l.b16 %v42
  %v314 = vunpack.c.l.b16 %v43
  %v315 = vunpack.c.l.b16 %v44
  %v316 = vunpack.c.l.b16 %v45
  %v317 = vunpack.c.l.b16 %v46
  %v318 = vunpack.c.l.b16 %v47
  %v319 = vunpack.c.l.b16 %v48
  %v320 = vunpack.c.l.b16 %v49
  %v321 = vunpack.c.l.b16 %v50
  %v322 = vunpack.c.l.b16 %v51
  %v323 = vunpack.c.l.b16 %v52
  %v324 = vunpack.c.l.b16 %v53
  %v325 = vunpack.c.l.b16 %v54
  %v326 = vunpack.c.l.b16 %v55
  %v327 = vunpack.c.l.b16 %v56
  %v328 = vunpack.c.l.b16 %v57
  %v329 = vunpack.c.l.b16 %v58
  %v330 = vunpack.c.l.b16 %v59
  %v331 = vunpack.c.l.b16 %v60
  %v332 = vunpack.c.l.b16 %v61
  %v333 = vunpack.c.l.b16 %v62
  %v334 = vunpack.c.l.b16 %v63
  %v335 = vunpack.c.l.b16 %v64
  %v336 = vunpack.c.l.b16 %v65
  %v337 = vunpack.c.l.b16 %v66
  %v338 = vunpack.c.l.b16 %v67
  %v339 = vunpack.c.l.b16 %v68
  %v340 = vunpack.c.l.b16 %v69
  %v341 = vunpack.c.l.b16 %v70
  %v342 = vunpack.c.l.b16 %v71
  %v343 = vunpack.c.l.b16 %v72
  %v344 = vunpack.c.l.b16 %v73
  %v345 = vunpack.c.l.b16 %v74
  %v346 = vunpack.c.l.b16 %v75
  %v347 = vunpack.c.l.b16 %v76
  %v348 = vunpack.c.l.b16 %v77
  %v349 = vunpack.c.l.b16 %v78
  %v350 = vunpack.c.l.b16 %v79
  %v351 = vunpack.c.l.b16 %v80
  %v352 = vunpack.c.l.b16 %v81
  %v353 = vunpack.c.l.b16 %v82
  %v354 = vunpack.c.l.b16 %v83
  %v355 = vunpack.c.l.b16 %v84
  %v356 = vunpack.c.l.b16 %v85
  %v357 = vunpack.c.l.b16 %v86
  %v358 = vunpack.c.l.b16 %v87
  %v359 = vunpack.c.l.b16 %v88
  %v360 = vunpack.c.l.b16 %v89
  %v361 = vunpack.c.l.b16 %v90
  %v362 = vunpack.c.l.b16 %v91
  %v363 = vunpack.c.l.b16 %v92
  %v364 = vunpack.c.l.b16 %v93
  %v365 = vunpack.c.l.b16 %v94
  %v366 = vunpack.c.l.b16 %v95
  %v367 = vunpack.c.l.b16 %v96
  %v368 = vunpack.c.l.b16 %v97
  %v369 = vunpack.c.l.b16 %v98
  %v370 = vunpack.c.l.b16 %v99
  %v371 = vunpack.c.l.b16 %v100
  %v372 = vunpack.c.l.b16 %v101
  %v373 = vunpack.c.l.b16 %v102
  %v374 = vunpack.c.l.b16 %v103
  %v375 = vunpack.c.l.b16 %v104
  %v376 = vunpack.c.l.b16 %v105
  %v377 = vunpack.c.l.b16 %v106
  %v378 = vunpack.c.l.b16 %v107
  %v379 = vunpack.c.l.b16 %v108
  %v380 = vunpack.c.l.b16 %v109
  %v381 = vunpack.c.l.b16 %v110
  %v382 = vunpack.c.l.b16 %v111
  %v383 = vunpack.c.l.b16 %v112
  %v384 = vunpack.c.l.b16 %v113
  %v385 = vunpack.c.l.b16 %v114
  %v386 = vunpack.c.l.b16 %v115
  %v387 = vunpack.c.l.b16 %v116
  %v388 = vunpack.c.l.b16 %v117
  %v389 = vunpack.c.l.b16 %v118
  %v390 = vunpack.c.l.b16 %v119
  %v391 = vunpack.c.l.b16 %v120
  %v392 = vunpack.c.l.b16 %v121
  %v393 = vunpack.c.l.b16 %v122
  %v394 = vunpack.c.l.b16 %v123
  %v395 = vunpack.c.l.b16 %v124
  %v396 = vunpack.c.l.b16 %v125
  %v397 = vunpack.c.l.b16 %v126
  %v398 = vunpack.c.l.b16 %v127
  %v399 = vunpack.c.l.b16 %v128
  %v400 = vunpack.c.l.b16 %v129
  %v401 = vunpack.c.l.b16 %v130
  %v402 = vunpack.c.l.b16 %v131
  %v403 = vunpack.c.l.b16 %v132
  %v404 = vunpack.c.l.b16 %v133
  %v405 = vunpack.c.l.b16 %v134
  %v406 = vunpack.c.l.b16 %v135
  %v407 = vunpack.c.l.b16 %v136
  %v408 = vunpack.c.l.b16 %v137
  %v409 = vunpack.c.l.b16 %v138
  %v410 = vunpack.c.l.b16 %v139
  %v411 = vunpack.c.l.b16 %v140
  %v412 = vunpack.c.l.b16 %v141
  %v413 = vunpack.c.l.b16 %v142
  %v414 = vpack.c.b16 %v287, %v286
  %v415 = vpack.c.b16 %v289, %v288
  %v416 = vpack.c.b16 %v291, %v290
  %v417 = vpack.c.b16 %v293, %v292
  %v418 = vpack.c.b16 %v295, %v294
  %v419 = vpack.c.b16 %v297, %v296
  %v420 = vpack.c.b16 %v299, %v298
  %v421 = vpack.c.b16 %v301, %v300
  %v422 = vpack.c.b16 %v303, %v302
  %v423 = vpack.c.b16 %v305, %v304
  %v424 = vpack.c.b16 %v307, %v306
  %v425 = vpack.c.b16 %v309, %v308
  %v426 = vpack.c.b16 %v311, %v310
  %v427 = vpack.c.b16 %v313, %v312
  %v428 = vpack.c.b16 %v315, %v314
  %v429 = vpack.c.b16 %v317, %v316
  %v430 = vpack.c.b16 %v319, %v318
  %v431 = vpack.c.b16 %v321, %v320
  %v432 = vpack.c.b16 %v323, %v322
  %v433 = vpack.c.b16 %v325, %v324
  %v434 = vpack.c.b16 %v327, %v326
  %v435 = vpack.c.b16 %v329, %v328
  %v436 = vpack.c.b16 %v331, %v330
  %v437 = vpack.c.b16 %v333, %v332
  %v438 = vpack.c.b16 %v335, %v334
  %v439 = vpack.c.b16 %v337, %v336
  %v440 = vpack.c.b16 %v339, %v338
  %v441 = vpack.c.b16 %v341, %v340
  %v442 = vpack.c.b16 %v343, %v342
  %v443 = vpack.c.b16 %v345, %v344
  %v444 = vpack.c.b16 %v347, %v346
  %v445 = vpack.c.b16 %v349, %v348
  %v446 = vpack.c.b16 %v351, %v350
  %v447 = vpack.c.b16 %v353, %v352
  %v448 = vpack.c.b16 %v355, %v354
  %v449 = vpack.c.b16 %v357, %v356
  %v450 = vpack.c.b16 %v359, %v358
  %v451 = vpack.c.b16 %v361, %v360
  %v452 = vpack.c.b16 %v363, %v362
  %v453 = vpack.c.b16 %v365, %v364
  %v454 = vpack.c.b16 %v367, %v366
  %v455 = vpack.c.b16 %v369, %v368
  %v456 = vpack.c.b16 %v371, %v370
  %v457 = vpack.c.b16 %v373, %v372
  %v458 = vpack.c.b16 %v375, %v374
  %v459 = vpack.c.b16 %v377, %v376
  %v460 = vpack.c.b16 %v379, %v378
  %v461 = vpack.c.b16 %v381, %v380
  %v462 = vpack.c.b16 %v383, %v382
  %v463 = vpack.c.b16 %v385, %v384
  %v464 = vpack.c.b16 %v387, %v386
  %v465 = vpack.c.b16 %v389, %v388
  %v466 = vpack.c.b16 %v391, %v390
  %v467 = vpack.c.b16 %v393, %v392
  %v468 = vpack.c.b16 %v395, %v394
  %v469 = vpack.c.b16 %v397, %v396
  %v470 = vpack.c.b16 %v399, %v398
  %v471 = vpack.c.b16 %v401, %v400
  %v472 = vpack.c.b16 %v403, %v402
  %v473 = vpack.c.b16 %v405, %v404
  %v474 = vpack.c.b16 %v407, %v406
  %v475 = vpack.c.b16 %v409, %v408
  %v476 = vpack.c.b16 %v411, %v410
  %v477 = vpack.c.b16 %v413, %v412
  %v486 = vunpack.c.l.b16 %v143
  %v487 = vunpack.c.l.b16 %v144
  %v488 = vunpack.c.l.b16 %v145
  %v489 = vunpack.c.l.b16 %v146
  %v490 = vunpack.c.l.b16 %v147
  %v491 = vunpack.c.l.b16 %v148
  %v492 = vunpack.c.l.b16 %v149
  %v493 = vunpack.c.l.b16 %v150
  %v494 = vpack.c.b16 %v487, %v486
  %v495 = vpack.c.b16 %v489, %v488
  %v496 = vpack.c.b16 %v491, %v490
  %v497 = vpack.c.b16 %v493, %v492
  %vm502 = vcmask 523264
  %v504 = vsel %vm502, %v414, 0
  %v507 = vsel %vm502, %v415, 0
  %v510 = vsel %vm502, %v416, 0
  %v513 = vsel %vm502, %v417, 0
  %v516 = vsel %vm502, %v418, 0
  %v519 = vsel %vm502, %v419, 0
  %v522 = vsel %vm502, %v420, 0
  %v525 = vsel %vm502, %v421, 0
  %v528 = vsel %vm502, %v422, 0
  %v531 = vsel %vm502, %v423, 0
  %v534 = vsel %vm502, %v424, 0
  %v537 = vsel %vm502, %v425, 0
  %v540 = vsel %vm502, %v426, 0
  %v543 = vsel %vm502, %v427, 0
  %v546 = vsel %vm502, %v428, 0
  %v549 = vsel %vm502, %v429, 0
  %v552 = vsel %vm502, %v430, 0
  %v555 = vsel %vm502, %v431, 0
  %v558 = vsel %vm502, %v432, 0
  %v561 = vsel %vm502, %v433, 0
  %v564 = vsel %vm502, %v434, 0
  %v567 = vsel %vm502, %v435, 0
  %v570 = vsel %vm502, %v436, 0
  %v573 = vsel %vm502, %v437, 0
  %v576 = vsel %vm502, %v438, 0
  %v579 = vsel %vm502, %v439, 0
  %v582 = vsel %vm502, %v440, 0
  %v585 = vsel %vm502, %v441, 0
  %v588 = vsel %vm502, %v442, 0
  %v591 = vsel %vm502, %v443, 0
  %v594 = vsel %vm502, %v444, 0
  %v597 = vsel %vm502, %v445, 0
  %v600 = vsel %vm502, %v446, 0
  %v603 = vsel %vm502, %v447, 0
  %v606 = vsel %vm502, %v448, 0
  %v609 = vsel %vm502, %v449, 0
  %v612 = vsel %vm502, %v450, 0
  %v615 = vsel %vm502, %v451, 0
  %v618 = vsel %vm502, %v452, 0
  %v621 = vsel %vm502, %v453, 0
  %v624 = vsel %vm502, %v454, 0
  %v627 = vsel %vm502, %v455, 0
  %v630 = vsel %vm502, %v456, 0
  %v633 = vsel %vm502, %v457, 0
  %v636 = vsel %vm502, %v458, 0
  %v639 = vsel %vm502, %v459, 0
  %v642 = vsel %vm502, %v460, 0
  %v645 = vsel %vm502, %v461, 0
  %v648 = vsel %vm502, %v462, 0
  %v651 = vsel %vm502, %v463, 0
  %v654 = vsel %vm502, %v464, 0
  %v657 = vsel %vm502, %v465, 0
  %v660 = vsel %vm502, %v466, 0
  %v663 = vsel %vm502, %v467, 0
  %v666 = vsel %vm502, %v468, 0
  %v669 = vsel %vm502, %v469, 0
  %v672 = vsel %vm502, %v470, 0
  %v675 = vsel %vm502, %v471, 0
  %v678 = vsel %vm502, %v472, 0
  %v681 = vsel %vm502, %v473, 0
  %v684 = vsel %vm502, %v474, 0
  %v687 = vsel %vm502, %v475, 0
  %v690 = vsel %vm502, %v476, 0
  %v693 = vsel %vm502, %v477, 0
  %695 = vmatprep.subr.bf16.mxu0 0
  %696 = vmatpush1.bf16.msra.mxu0 %v494
  %697 = vmatprep.subr.bf16.mxu0 0
  %698 = vmatpush1.bf16.msra.mxu0 %v495
  %699 = vmatprep.subr.bf16.mxu0 0
  %700 = vmatpush1.bf16.msra.mxu0 %v496
  %701 = vmatprep.subr.bf16.mxu0 0
  %702 = vmatpush1.bf16.msra.mxu0 %v497
  %703 = vmatprep.subr.bf16.mxu0 0
  %704 = vmatpush1.bf16.msra.mxu0 0
  %705 = vmatprep.subr.bf16.mxu0 0
  %706 = vmatpush1.bf16.msra.mxu0 0
  %707 = vmatprep.subr.bf16.mxu0 0
  %708 = vmatpush1.bf16.msra.mxu0 0
  %709 = vmatprep.subr.bf16.mxu0 0
  %710 = vmatpush1.bf16.msra.mxu0 0
  %711 = vmatprep.subr.bf16.mxu0 0
  %712 = vmatpush1.bf16.msra.mxu0 0
  %713 = vmatprep.subr.bf16.mxu0 0
  %714 = vmatpush1.bf16.msra.mxu0 0
  %715 = vmatprep.subr.bf16.mxu0 0
  %716 = vmatpush1.bf16.msra.mxu0 0
  %717 = vmatprep.subr.bf16.mxu0 0
  %718 = vmatpush1.bf16.msra.mxu0 0
  %719 = vmatprep.subr.bf16.mxu0 0
  %720 = vmatpush1.bf16.msra.mxu0 0
  %721 = vmatprep.subr.bf16.mxu0 0
  %722 = vmatpush1.bf16.msra.mxu0 0
  %723 = vmatprep.subr.bf16.mxu0 0
  %724 = vmatpush1.bf16.msra.mxu0 0
  %725 = vmatprep.subr.bf16.mxu0 0
  %726 = vmatpush1.bf16.msra.mxu0 0
  %727 = vmatprep.mubr.bf16.mxu0 0
  %728 = vmatmul.mubr.bf16.gmra.mrb[0].mxu0 %v504
  %v729 = vpop.f32.mrb[0].mxu0
  %v730 = vadd.f32 %v156, %v729
  %v731 = vpop.f32.mrb[0].mxu0
  %v732 = vpop.f32.mrb[0].mxu0
  %v733 = vadd.f32 %v156, %v732
  %v734 = vpop.f32.mrb[0].mxu0
  %735 = vmatprep.mubr.bf16.mxu0 0
  %736 = vmatmul.mubr.bf16.gmra.mrb[0].mxu0 %v507
  %v737 = vpop.f32.mrb[0].mxu0
  %v738 = vadd.f32 %v156, %v737
  %v739 = vpop.f32.mrb[0].mxu0
  %v740 = vpop.f32.mrb[0].mxu0
  %v741 = vadd.f32 %v156, %v740
  %v742 = vpop.f32.mrb[0].mxu0
  %743 = vmatprep.mubr.bf16.mxu0 0
  %744 = vmatmul.mubr.bf16.gmra.mrb[0].mxu0 %v510
  %v745 = vpop.f32.mrb[0].mxu0
  %v746 = vadd.f32 %v156, %v745
  %v747 = vpop.f32.mrb[0].mxu0
  %v748 = vpop.f32.mrb[0].mxu0
  %v749 = vadd.f32 %v156, %v748
  %v750 = vpop.f32.mrb[0].mxu0
  %751 = vmatprep.mubr.bf16.mxu0 0
  %752 = vmatmul.mubr.bf16.gmra.mrb[0].mxu0 %v513
  %v753 = vpop.f32.mrb[0].mxu0
  %v754 = vadd.f32 %v156, %v753
  %v755 = vpop.f32.mrb[0].mxu0
  %v756 = vpop.f32.mrb[0].mxu0
  %v757 = vadd.f32 %v156, %v756
  %v758 = vpop.f32.mrb[0].mxu0
  %759 = vmatprep.mubr.bf16.mxu0 0
  %760 = vmatmul.mubr.bf16.gmra.mrb[0].mxu0 %v516
  %v761 = vpop.f32.mrb[0].mxu0
  %v762 = vadd.f32 %v156, %v761
  %v763 = vpop.f32.mrb[0].mxu0
  %v764 = vpop.f32.mrb[0].mxu0
  %v765 = vadd.f32 %v156, %v764
  %v766 = vpop.f32.mrb[0].mxu0
  %767 = vmatprep.mubr.bf16.mxu0 0
  %768 = vmatmul.mubr.bf16.gmra.mrb[0].mxu0 %v519
  %v769 = vpop.f32.mrb[0].mxu0
  %v770 = vadd.f32 %v156, %v769
  %v771 = vpop.f32.mrb[0].mxu0
  %v772 = vpop.f32.mrb[0].mxu0
  %v773 = vadd.f32 %v156, %v772
  %v774 = vpop.f32.mrb[0].mxu0
  %775 = vmatprep.mubr.bf16.mxu0 0
  %776 = vmatmul.mubr.bf16.gmra.mrb[0].mxu0 %v522
  %v777 = vpop.f32.mrb[0].mxu0
  %v778 = vadd.f32 %v156, %v777
  %v779 = vpop.f32.mrb[0].mxu0
  %v780 = vpop.f32.mrb[0].mxu0
  %v781 = vadd.f32 %v156, %v780
  %v782 = vpop.f32.mrb[0].mxu0
  %783 = vmatprep.mubr.bf16.mxu0 0
  %784 = vmatmul.mubr.bf16.gmra.mrb[0].mxu0 %v525
  %v785 = vpop.f32.mrb[0].mxu0
  %v786 = vadd.f32 %v156, %v785
  %v787 = vpop.f32.mrb[0].mxu0
  %v788 = vpop.f32.mrb[0].mxu0
  %v789 = vadd.f32 %v156, %v788
  %v790 = vpop.f32.mrb[0].mxu0
  %791 = vmatprep.mubr.bf16.mxu0 0
  %792 = vmatmul.mubr.bf16.gmra.mrb[0].mxu0 %v528
  %v793 = vpop.f32.mrb[0].mxu0
  %v794 = vadd.f32 %v156, %v793
  %v795 = vpop.f32.mrb[0].mxu0
  %v796 = vpop.f32.mrb[0].mxu0
  %v797 = vadd.f32 %v156, %v796
  %v798 = vpop.f32.mrb[0].mxu0
  %799 = vmatprep.mubr.bf16.mxu0 0
  %800 = vmatmul.mubr.bf16.gmra.mrb[0].mxu0 %v531
  %v801 = vpop.f32.mrb[0].mxu0
  %v802 = vadd.f32 %v156, %v801
  %v803 = vpop.f32.mrb[0].mxu0
  %v804 = vpop.f32.mrb[0].mxu0
  %v805 = vadd.f32 %v156, %v804
  %v806 = vpop.f32.mrb[0].mxu0
  %807 = vmatprep.mubr.bf16.mxu0 0
  %808 = vmatmul.mubr.bf16.gmra.mrb[0].mxu0 %v534
  %v809 = vpop.f32.mrb[0].mxu0
  %v810 = vadd.f32 %v156, %v809
  %v811 = vpop.f32.mrb[0].mxu0
  %v812 = vpop.f32.mrb[0].mxu0
  %v813 = vadd.f32 %v156, %v812
  %v814 = vpop.f32.mrb[0].mxu0
  %815 = vmatprep.mubr.bf16.mxu0 0
  %816 = vmatmul.mubr.bf16.gmra.mrb[0].mxu0 %v537
  %v817 = vpop.f32.mrb[0].mxu0
  %v818 = vadd.f32 %v156, %v817
  %v819 = vpop.f32.mrb[0].mxu0
  %v820 = vpop.f32.mrb[0].mxu0
  %v821 = vadd.f32 %v156, %v820
  %v822 = vpop.f32.mrb[0].mxu0
  %823 = vmatprep.mubr.bf16.mxu0 0
  %824 = vmatmul.mubr.bf16.gmra.mrb[0].mxu0 %v540
  %v825 = vpop.f32.mrb[0].mxu0
  %v826 = vadd.f32 %v156, %v825
  %v827 = vpop.f32.mrb[0].mxu0
  %v828 = vpop.f32.mrb[0].mxu0
  %v829 = vadd.f32 %v156, %v828
  %v830 = vpop.f32.mrb[0].mxu0
  %831 = vmatprep.mubr.bf16.mxu0 0
  %832 = vmatmul.mubr.bf16.gmra.mrb[0].mxu0 %v543
  %v833 = vpop.f32.mrb[0].mxu0
  %v834 = vadd.f32 %v156, %v833
  %v835 = vpop.f32.mrb[0].mxu0
  %v836 = vpop.f32.mrb[0].mxu0
  %v837 = vadd.f32 %v156, %v836
  %v838 = vpop.f32.mrb[0].mxu0
  %839 = vmatprep.mubr.bf16.mxu0 0
  %840 = vmatmul.mubr.bf16.gmra.mrb[0].mxu0 %v546
  %v841 = vpop.f32.mrb[0].mxu0
  %v842 = vadd.f32 %v156, %v841
  %v843 = vpop.f32.mrb[0].mxu0
  %v844 = vpop.f32.mrb[0].mxu0
  %v845 = vadd.f32 %v156, %v844
  %v846 = vpop.f32.mrb[0].mxu0
  %847 = vmatprep.mubr.bf16.mxu0 0
  %848 = vmatmul.mubr.bf16.gmra.mrb[0].mxu0 %v549
  %v849 = vpop.f32.mrb[0].mxu0
  %v850 = vadd.f32 %v156, %v849
  %v851 = vpop.f32.mrb[0].mxu0
  %v852 = vpop.f32.mrb[0].mxu0
  %v853 = vadd.f32 %v156, %v852
  %v854 = vpop.f32.mrb[0].mxu0
  %855 = vmatprep.mubr.bf16.mxu0 0
  %856 = vmatmul.mubr.bf16.gmra.mrb[0].mxu0 %v552
  %v857 = vpop.f32.mrb[0].mxu0
  %v858 = vadd.f32 %v156, %v857
  %v859 = vpop.f32.mrb[0].mxu0
  %v860 = vpop.f32.mrb[0].mxu0
  %v861 = vadd.f32 %v156, %v860
  %v862 = vpop.f32.mrb[0].mxu0
  %863 = vmatprep.mubr.bf16.mxu0 0
  %864 = vmatmul.mubr.bf16.gmra.mrb[0].mxu0 %v555
  %v865 = vpop.f32.mrb[0].mxu0
  %v866 = vadd.f32 %v156, %v865
  %v867 = vpop.f32.mrb[0].mxu0
  %v868 = vpop.f32.mrb[0].mxu0
  %v869 = vadd.f32 %v156, %v868
  %v870 = vpop.f32.mrb[0].mxu0
  %871 = vmatprep.mubr.bf16.mxu0 0
  %872 = vmatmul.mubr.bf16.gmra.mrb[0].mxu0 %v558
  %v873 = vpop.f32.mrb[0].mxu0
  %v874 = vadd.f32 %v156, %v873
  %v875 = vpop.f32.mrb[0].mxu0
  %v876 = vpop.f32.mrb[0].mxu0
  %v877 = vadd.f32 %v156, %v876
  %v878 = vpop.f32.mrb[0].mxu0
  %879 = vmatprep.mubr.bf16.mxu0 0
  %880 = vmatmul.mubr.bf16.gmra.mrb[0].mxu0 %v561
  %v881 = vpop.f32.mrb[0].mxu0
  %v882 = vadd.f32 %v156, %v881
  %v883 = vpop.f32.mrb[0].mxu0
  %v884 = vpop.f32.mrb[0].mxu0
  %v885 = vadd.f32 %v156, %v884
  %v886 = vpop.f32.mrb[0].mxu0
  %887 = vmatprep.mubr.bf16.mxu0 0
  %888 = vmatmul.mubr.bf16.gmra.mrb[0].mxu0 %v564
  %v889 = vpop.f32.mrb[0].mxu0
  %v890 = vadd.f32 %v156, %v889
  %v891 = vpop.f32.mrb[0].mxu0
  %v892 = vpop.f32.mrb[0].mxu0
  %v893 = vadd.f32 %v156, %v892
  %v894 = vpop.f32.mrb[0].mxu0
  %895 = vmatprep.mubr.bf16.mxu0 0
  %896 = vmatmul.mubr.bf16.gmra.mrb[0].mxu0 %v567
  %v897 = vpop.f32.mrb[0].mxu0
  %v898 = vadd.f32 %v156, %v897
  %v899 = vpop.f32.mrb[0].mxu0
  %v900 = vpop.f32.mrb[0].mxu0
  %v901 = vadd.f32 %v156, %v900
  %v902 = vpop.f32.mrb[0].mxu0
  %903 = vmatprep.mubr.bf16.mxu0 0
  %904 = vmatmul.mubr.bf16.gmra.mrb[0].mxu0 %v570
  %v905 = vpop.f32.mrb[0].mxu0
  %v906 = vadd.f32 %v156, %v905
  %v907 = vpop.f32.mrb[0].mxu0
  %v908 = vpop.f32.mrb[0].mxu0
  %v909 = vadd.f32 %v156, %v908
  %v910 = vpop.f32.mrb[0].mxu0
  %911 = vmatprep.mubr.bf16.mxu0 0
  %912 = vmatmul.mubr.bf16.gmra.mrb[0].mxu0 %v573
  %v913 = vpop.f32.mrb[0].mxu0
  %v914 = vadd.f32 %v156, %v913
  %v915 = vpop.f32.mrb[0].mxu0
  %v916 = vpop.f32.mrb[0].mxu0
  %v917 = vadd.f32 %v156, %v916
  %v918 = vpop.f32.mrb[0].mxu0
  %919 = vmatprep.mubr.bf16.mxu0 0
  %920 = vmatmul.mubr.bf16.gmra.mrb[0].mxu0 %v576
  %v921 = vpop.f32.mrb[0].mxu0
  %v922 = vadd.f32 %v156, %v921
  %v923 = vpop.f32.mrb[0].mxu0
  %v924 = vpop.f32.mrb[0].mxu0
  %v925 = vadd.f32 %v156, %v924
  %v926 = vpop.f32.mrb[0].mxu0
  %927 = vmatprep.mubr.bf16.mxu0 0
  %928 = vmatmul.mubr.bf16.gmra.mrb[0].mxu0 %v579
  %v929 = vpop.f32.mrb[0].mxu0
  %v930 = vadd.f32 %v156, %v929
  %v931 = vpop.f32.mrb[0].mxu0
  %v932 = vpop.f32.mrb[0].mxu0
  %v933 = vadd.f32 %v156, %v932
  %v934 = vpop.f32.mrb[0].mxu0
  %935 = vmatprep.mubr.bf16.mxu0 0
  %936 = vmatmul.mubr.bf16.gmra.mrb[0].mxu0 %v582
  %v937 = vpop.f32.mrb[0].mxu0
  %v938 = vadd.f32 %v156, %v937
  %v939 = vpop.f32.mrb[0].mxu0
  %v940 = vpop.f32.mrb[0].mxu0
  %v941 = vadd.f32 %v156, %v940
  %v942 = vpop.f32.mrb[0].mxu0
  %943 = vmatprep.mubr.bf16.mxu0 0
  %944 = vmatmul.mubr.bf16.gmra.mrb[0].mxu0 %v585
  %v945 = vpop.f32.mrb[0].mxu0
  %v946 = vadd.f32 %v156, %v945
  %v947 = vpop.f32.mrb[0].mxu0
  %v948 = vpop.f32.mrb[0].mxu0
  %v949 = vadd.f32 %v156, %v948
  %v950 = vpop.f32.mrb[0].mxu0
  %951 = vmatprep.mubr.bf16.mxu0 0
  %952 = vmatmul.mubr.bf16.gmra.mrb[0].mxu0 %v588
  %v953 = vpop.f32.mrb[0].mxu0
  %v954 = vadd.f32 %v156, %v953
  %v955 = vpop.f32.mrb[0].mxu0
  %v956 = vpop.f32.mrb[0].mxu0
  %v957 = vadd.f32 %v156, %v956
  %v958 = vpop.f32.mrb[0].mxu0
  %959 = vmatprep.mubr.bf16.mxu0 0
  %960 = vmatmul.mubr.bf16.gmra.mrb[0].mxu0 %v591
  %v961 = vpop.f32.mrb[0].mxu0
  %v962 = vadd.f32 %v156, %v961
  %v963 = vpop.f32.mrb[0].mxu0
  %v964 = vpop.f32.mrb[0].mxu0
  %v965 = vadd.f32 %v156, %v964
  %v966 = vpop.f32.mrb[0].mxu0
  %967 = vmatprep.mubr.bf16.mxu0 0
  %968 = vmatmul.mubr.bf16.gmra.mrb[0].mxu0 %v594
  %v969 = vpop.f32.mrb[0].mxu0
  %v970 = vadd.f32 %v156, %v969
  %v971 = vpop.f32.mrb[0].mxu0
  %v972 = vpop.f32.mrb[0].mxu0
  %v973 = vadd.f32 %v156, %v972
  %v974 = vpop.f32.mrb[0].mxu0
  %975 = vmatprep.mubr.bf16.mxu0 0
  %976 = vmatmul.mubr.bf16.gmra.mrb[0].mxu0 %v597
  %v977 = vpop.f32.mrb[0].mxu0
  %v978 = vadd.f32 %v156, %v977
  %v979 = vpop.f32.mrb[0].mxu0
  %v980 = vpop.f32.mrb[0].mxu0
  %v981 = vadd.f32 %v156, %v980
  %v982 = vpop.f32.mrb[0].mxu0
  %983 = vmatprep.mubr.bf16.mxu0 0
  %984 = vmatmul.mubr.bf16.gmra.mrb[0].mxu0 %v600
  %v985 = vpop.f32.mrb[0].mxu0
  %v986 = vadd.f32 %v156, %v985
  %v987 = vpop.f32.mrb[0].mxu0
  %v988 = vpop.f32.mrb[0].mxu0
  %v989 = vadd.f32 %v156, %v988
  %v990 = vpop.f32.mrb[0].mxu0
  %991 = vmatprep.mubr.bf16.mxu0 0
  %992 = vmatmul.mubr.bf16.gmra.mrb[0].mxu0 %v603
  %v993 = vpop.f32.mrb[0].mxu0
  %v994 = vadd.f32 %v156, %v993
  %v995 = vpop.f32.mrb[0].mxu0
  %v996 = vpop.f32.mrb[0].mxu0
  %v997 = vadd.f32 %v156, %v996
  %v998 = vpop.f32.mrb[0].mxu0
  %999 = vmatprep.mubr.bf16.mxu0 0
  %1000 = vmatmul.mubr.bf16.gmra.mrb[0].mxu0 %v606
  %v1001 = vpop.f32.mrb[0].mxu0
  %v1002 = vadd.f32 %v156, %v1001
  %v1003 = vpop.f32.mrb[0].mxu0
  %v1004 = vpop.f32.mrb[0].mxu0
  %v1005 = vadd.f32 %v156, %v1004
  %v1006 = vpop.f32.mrb[0].mxu0
  %1007 = vmatprep.mubr.bf16.mxu0 0
  %1008 = vmatmul.mubr.bf16.gmra.mrb[0].mxu0 %v609
  %v1009 = vpop.f32.mrb[0].mxu0
  %v1010 = vadd.f32 %v156, %v1009
  %v1011 = vpop.f32.mrb[0].mxu0
  %v1012 = vpop.f32.mrb[0].mxu0
  %v1013 = vadd.f32 %v156, %v1012
  %v1014 = vpop.f32.mrb[0].mxu0
  %1015 = vmatprep.mubr.bf16.mxu0 0
  %1016 = vmatmul.mubr.bf16.gmra.mrb[0].mxu0 %v612
  %v1017 = vpop.f32.mrb[0].mxu0
  %v1018 = vadd.f32 %v156, %v1017
  %v1019 = vpop.f32.mrb[0].mxu0
  %v1020 = vpop.f32.mrb[0].mxu0
  %v1021 = vadd.f32 %v156, %v1020
  %v1022 = vpop.f32.mrb[0].mxu0
  %1023 = vmatprep.mubr.bf16.mxu0 0
  %1024 = vmatmul.mubr.bf16.gmra.mrb[0].mxu0 %v615
  %v1025 = vpop.f32.mrb[0].mxu0
  %v1026 = vadd.f32 %v156, %v1025
  %v1027 = vpop.f32.mrb[0].mxu0
  %v1028 = vpop.f32.mrb[0].mxu0
  %v1029 = vadd.f32 %v156, %v1028
  %v1030 = vpop.f32.mrb[0].mxu0
  %1031 = vmatprep.mubr.bf16.mxu0 0
  %1032 = vmatmul.mubr.bf16.gmra.mrb[0].mxu0 %v618
  %v1033 = vpop.f32.mrb[0].mxu0
  %v1034 = vadd.f32 %v156, %v1033
  %v1035 = vpop.f32.mrb[0].mxu0
  %v1036 = vpop.f32.mrb[0].mxu0
  %v1037 = vadd.f32 %v156, %v1036
  %v1038 = vpop.f32.mrb[0].mxu0
  %1039 = vmatprep.mubr.bf16.mxu0 0
  %1040 = vmatmul.mubr.bf16.gmra.mrb[0].mxu0 %v621
  %v1041 = vpop.f32.mrb[0].mxu0
  %v1042 = vadd.f32 %v156, %v1041
  %v1043 = vpop.f32.mrb[0].mxu0
  %v1044 = vpop.f32.mrb[0].mxu0
  %v1045 = vadd.f32 %v156, %v1044
  %v1046 = vpop.f32.mrb[0].mxu0
  %1047 = vmatprep.mubr.bf16.mxu0 0
  %1048 = vmatmul.mubr.bf16.gmra.mrb[0].mxu0 %v624
  %v1049 = vpop.f32.mrb[0].mxu0
  %v1050 = vadd.f32 %v156, %v1049
  %v1051 = vpop.f32.mrb[0].mxu0
  %v1052 = vpop.f32.mrb[0].mxu0
  %v1053 = vadd.f32 %v156, %v1052
  %v1054 = vpop.f32.mrb[0].mxu0
  %1055 = vmatprep.mubr.bf16.mxu0 0
  %1056 = vmatmul.mubr.bf16.gmra.mrb[0].mxu0 %v627
  %v1057 = vpop.f32.mrb[0].mxu0
  %v1058 = vadd.f32 %v156, %v1057
  %v1059 = vpop.f32.mrb[0].mxu0
  %v1060 = vpop.f32.mrb[0].mxu0
  %v1061 = vadd.f32 %v156, %v1060
  %v1062 = vpop.f32.mrb[0].mxu0
  %1063 = vmatprep.mubr.bf16.mxu0 0
  %1064 = vmatmul.mubr.bf16.gmra.mrb[0].mxu0 %v630
  %v1065 = vpop.f32.mrb[0].mxu0
  %v1066 = vadd.f32 %v156, %v1065
  %v1067 = vpop.f32.mrb[0].mxu0
  %v1068 = vpop.f32.mrb[0].mxu0
  %v1069 = vadd.f32 %v156, %v1068
  %v1070 = vpop.f32.mrb[0].mxu0
  %1071 = vmatprep.mubr.bf16.mxu0 0
  %1072 = vmatmul.mubr.bf16.gmra.mrb[0].mxu0 %v633
  %v1073 = vpop.f32.mrb[0].mxu0
  %v1074 = vadd.f32 %v156, %v1073
  %v1075 = vpop.f32.mrb[0].mxu0
  %v1076 = vpop.f32.mrb[0].mxu0
  %v1077 = vadd.f32 %v156, %v1076
  %v1078 = vpop.f32.mrb[0].mxu0
  %1079 = vmatprep.mubr.bf16.mxu0 0
  %1080 = vmatmul.mubr.bf16.gmra.mrb[0].mxu0 %v636
  %v1081 = vpop.f32.mrb[0].mxu0
  %v1082 = vadd.f32 %v156, %v1081
  %v1083 = vpop.f32.mrb[0].mxu0
  %v1084 = vpop.f32.mrb[0].mxu0
  %v1085 = vadd.f32 %v156, %v1084
  %v1086 = vpop.f32.mrb[0].mxu0
  %1087 = vmatprep.mubr.bf16.mxu0 0
  %1088 = vmatmul.mubr.bf16.gmra.mrb[0].mxu0 %v639
  %v1089 = vpop.f32.mrb[0].mxu0
  %v1090 = vadd.f32 %v156, %v1089
  %v1091 = vpop.f32.mrb[0].mxu0
  %v1092 = vpop.f32.mrb[0].mxu0
  %v1093 = vadd.f32 %v156, %v1092
  %v1094 = vpop.f32.mrb[0].mxu0
  %1095 = vmatprep.mubr.bf16.mxu0 0
  %1096 = vmatmul.mubr.bf16.gmra.mrb[0].mxu0 %v642
  %v1097 = vpop.f32.mrb[0].mxu0
  %v1098 = vadd.f32 %v156, %v1097
  %v1099 = vpop.f32.mrb[0].mxu0
  %v1100 = vpop.f32.mrb[0].mxu0
  %v1101 = vadd.f32 %v156, %v1100
  %v1102 = vpop.f32.mrb[0].mxu0
  %1103 = vmatprep.mubr.bf16.mxu0 0
  %1104 = vmatmul.mubr.bf16.gmra.mrb[0].mxu0 %v645
  %v1105 = vpop.f32.mrb[0].mxu0
  %v1106 = vadd.f32 %v156, %v1105
  %v1107 = vpop.f32.mrb[0].mxu0
  %v1108 = vpop.f32.mrb[0].mxu0
  %v1109 = vadd.f32 %v156, %v1108
  %v1110 = vpop.f32.mrb[0].mxu0
  %1111 = vmatprep.mubr.bf16.mxu0 0
  %1112 = vmatmul.mubr.bf16.gmra.mrb[0].mxu0 %v648
  %v1113 = vpop.f32.mrb[0].mxu0
  %v1114 = vadd.f32 %v156, %v1113
  %v1115 = vpop.f32.mrb[0].mxu0
  %v1116 = vpop.f32.mrb[0].mxu0
  %v1117 = vadd.f32 %v156, %v1116
  %v1118 = vpop.f32.mrb[0].mxu0
  %1119 = vmatprep.mubr.bf16.mxu0 0
  %1120 = vmatmul.mubr.bf16.gmra.mrb[0].mxu0 %v651
  %v1121 = vpop.f32.mrb[0].mxu0
  %v1122 = vadd.f32 %v156, %v1121
  %v1123 = vpop.f32.mrb[0].mxu0
  %v1124 = vpop.f32.mrb[0].mxu0
  %v1125 = vadd.f32 %v156, %v1124
  %v1126 = vpop.f32.mrb[0].mxu0
  %1127 = vmatprep.mubr.bf16.mxu0 0
  %1128 = vmatmul.mubr.bf16.gmra.mrb[0].mxu0 %v654
  %v1129 = vpop.f32.mrb[0].mxu0
  %v1130 = vadd.f32 %v156, %v1129
  %v1131 = vpop.f32.mrb[0].mxu0
  %v1132 = vpop.f32.mrb[0].mxu0
  %v1133 = vadd.f32 %v156, %v1132
  %v1134 = vpop.f32.mrb[0].mxu0
  %1135 = vmatprep.mubr.bf16.mxu0 0
  %1136 = vmatmul.mubr.bf16.gmra.mrb[0].mxu0 %v657
  %v1137 = vpop.f32.mrb[0].mxu0
  %v1138 = vadd.f32 %v156, %v1137
  %v1139 = vpop.f32.mrb[0].mxu0
  %v1140 = vpop.f32.mrb[0].mxu0
  %v1141 = vadd.f32 %v156, %v1140
  %v1142 = vpop.f32.mrb[0].mxu0
  %1143 = vmatprep.mubr.bf16.mxu0 0
  %1144 = vmatmul.mubr.bf16.gmra.mrb[0].mxu0 %v660
  %v1145 = vpop.f32.mrb[0].mxu0
  %v1146 = vadd.f32 %v156, %v1145
  %v1147 = vpop.f32.mrb[0].mxu0
  %v1148 = vpop.f32.mrb[0].mxu0
  %v1149 = vadd.f32 %v156, %v1148
  %v1150 = vpop.f32.mrb[0].mxu0
  %1151 = vmatprep.mubr.bf16.mxu0 0
  %1152 = vmatmul.mubr.bf16.gmra.mrb[0].mxu0 %v663
  %v1153 = vpop.f32.mrb[0].mxu0
  %v1154 = vadd.f32 %v156, %v1153
  %v1155 = vpop.f32.mrb[0].mxu0
  %v1156 = vpop.f32.mrb[0].mxu0
  %v1157 = vadd.f32 %v156, %v1156
  %v1158 = vpop.f32.mrb[0].mxu0
  %1159 = vmatprep.mubr.bf16.mxu0 0
  %1160 = vmatmul.mubr.bf16.gmra.mrb[0].mxu0 %v666
  %v1161 = vpop.f32.mrb[0].mxu0
  %v1162 = vadd.f32 %v156, %v1161
  %v1163 = vpop.f32.mrb[0].mxu0
  %v1164 = vpop.f32.mrb[0].mxu0
  %v1165 = vadd.f32 %v156, %v1164
  %v1166 = vpop.f32.mrb[0].mxu0
  %1167 = vmatprep.mubr.bf16.mxu0 0
  %1168 = vmatmul.mubr.bf16.gmra.mrb[0].mxu0 %v669
  %v1169 = vpop.f32.mrb[0].mxu0
  %v1170 = vadd.f32 %v156, %v1169
  %v1171 = vpop.f32.mrb[0].mxu0
  %v1172 = vpop.f32.mrb[0].mxu0
  %v1173 = vadd.f32 %v156, %v1172
  %v1174 = vpop.f32.mrb[0].mxu0
  %1175 = vmatprep.mubr.bf16.mxu0 0
  %1176 = vmatmul.mubr.bf16.gmra.mrb[0].mxu0 %v672
  %v1177 = vpop.f32.mrb[0].mxu0
  %v1178 = vadd.f32 %v156, %v1177
  %v1179 = vpop.f32.mrb[0].mxu0
  %v1180 = vpop.f32.mrb[0].mxu0
  %v1181 = vadd.f32 %v156, %v1180
  %v1182 = vpop.f32.mrb[0].mxu0
  %1183 = vmatprep.mubr.bf16.mxu0 0
  %1184 = vmatmul.mubr.bf16.gmra.mrb[0].mxu0 %v675
  %v1185 = vpop.f32.mrb[0].mxu0
  %v1186 = vadd.f32 %v156, %v1185
  %v1187 = vpop.f32.mrb[0].mxu0
  %v1188 = vpop.f32.mrb[0].mxu0
  %v1189 = vadd.f32 %v156, %v1188
  %v1190 = vpop.f32.mrb[0].mxu0
  %1191 = vmatprep.mubr.bf16.mxu0 0
  %1192 = vmatmul.mubr.bf16.gmra.mrb[0].mxu0 %v678
  %v1193 = vpop.f32.mrb[0].mxu0
  %v1194 = vadd.f32 %v156, %v1193
  %v1195 = vpop.f32.mrb[0].mxu0
  %v1196 = vpop.f32.mrb[0].mxu0
  %v1197 = vadd.f32 %v156, %v1196
  %v1198 = vpop.f32.mrb[0].mxu0
  %1199 = vmatprep.mubr.bf16.mxu0 0
  %1200 = vmatmul.mubr.bf16.gmra.mrb[0].mxu0 %v681
  %v1201 = vpop.f32.mrb[0].mxu0
  %v1202 = vadd.f32 %v156, %v1201
  %v1203 = vpop.f32.mrb[0].mxu0
  %v1204 = vpop.f32.mrb[0].mxu0
  %v1205 = vadd.f32 %v156, %v1204
  %v1206 = vpop.f32.mrb[0].mxu0
  %1207 = vmatprep.mubr.bf16.mxu0 0
  %1208 = vmatmul.mubr.bf16.gmra.mrb[0].mxu0 %v684
  %v1209 = vpop.f32.mrb[0].mxu0
  %v1210 = vadd.f32 %v156, %v1209
  %v1211 = vpop.f32.mrb[0].mxu0
  %v1212 = vpop.f32.mrb[0].mxu0
  %v1213 = vadd.f32 %v156, %v1212
  %v1214 = vpop.f32.mrb[0].mxu0
  %1215 = vmatprep.mubr.bf16.mxu0 0
  %1216 = vmatmul.mubr.bf16.gmra.mrb[0].mxu0 %v687
  %v1217 = vpop.f32.mrb[0].mxu0
  %v1218 = vadd.f32 %v156, %v1217
  %v1219 = vpop.f32.mrb[0].mxu0
  %v1220 = vpop.f32.mrb[0].mxu0
  %v1221 = vadd.f32 %v156, %v1220
  %v1222 = vpop.f32.mrb[0].mxu0
  %1223 = vmatprep.mubr.bf16.mxu0 0
  %1224 = vmatmul.mubr.bf16.gmra.mrb[0].mxu0 %v690
  %v1225 = vpop.f32.mrb[0].mxu0
  %v1226 = vadd.f32 %v156, %v1225
  %v1227 = vpop.f32.mrb[0].mxu0
  %v1228 = vpop.f32.mrb[0].mxu0
  %v1229 = vadd.f32 %v156, %v1228
  %v1230 = vpop.f32.mrb[0].mxu0
  %1231 = vmatprep.mubr.bf16.mxu0 0
  %1232 = vmatmul.mubr.bf16.gmra.mrb[0].mxu0 %v693
  %v1233 = vpop.f32.mrb[0].mxu0
  %v1234 = vadd.f32 %v156, %v1233
  %v1235 = vpop.f32.mrb[0].mxu0
  %v1236 = vpop.f32.mrb[0].mxu0
  %v1237 = vadd.f32 %v156, %v1236
  %v1238 = vpop.f32.mrb[0].mxu0
  %1239 = vdwg.mxu0
  %v1240 = vmax.f32 %v730, 0.0
  %v1241 = vmax.f32 %v733, 0.0
  %v1242 = vmax.f32 %v738, 0.0
  %v1243 = vmax.f32 %v741, 0.0
  %v1244 = vmax.f32 %v746, 0.0
  %v1245 = vmax.f32 %v749, 0.0
  %v1246 = vmax.f32 %v754, 0.0
  %v1247 = vmax.f32 %v757, 0.0
  %v1248 = vmax.f32 %v762, 0.0
  %v1249 = vmax.f32 %v765, 0.0
  %v1250 = vmax.f32 %v770, 0.0
  %v1251 = vmax.f32 %v773, 0.0
  %v1252 = vmax.f32 %v778, 0.0
  %v1253 = vmax.f32 %v781, 0.0
  %v1254 = vmax.f32 %v786, 0.0
  %v1255 = vmax.f32 %v789, 0.0
  %v1256 = vmax.f32 %v794, 0.0
  %v1257 = vmax.f32 %v797, 0.0
  %v1258 = vmax.f32 %v802, 0.0
  %v1259 = vmax.f32 %v805, 0.0
  %v1260 = vmax.f32 %v810, 0.0
  %v1261 = vmax.f32 %v813, 0.0
  %v1262 = vmax.f32 %v818, 0.0
  %v1263 = vmax.f32 %v821, 0.0
  %v1264 = vmax.f32 %v826, 0.0
  %v1265 = vmax.f32 %v829, 0.0
  %v1266 = vmax.f32 %v834, 0.0
  %v1267 = vmax.f32 %v837, 0.0
  %v1268 = vmax.f32 %v842, 0.0
  %v1269 = vmax.f32 %v845, 0.0
  %v1270 = vmax.f32 %v850, 0.0
  %v1271 = vmax.f32 %v853, 0.0
  %v1272 = vmax.f32 %v858, 0.0
  %v1273 = vmax.f32 %v861, 0.0
  %v1274 = vmax.f32 %v866, 0.0
  %v1275 = vmax.f32 %v869, 0.0
  %v1276 = vmax.f32 %v874, 0.0
  %v1277 = vmax.f32 %v877, 0.0
  %v1278 = vmax.f32 %v882, 0.0
  %v1279 = vmax.f32 %v885, 0.0
  %v1280 = vmax.f32 %v890, 0.0
  %v1281 = vmax.f32 %v893, 0.0
  %v1282 = vmax.f32 %v898, 0.0
  %v1283 = vmax.f32 %v901, 0.0
  %v1284 = vmax.f32 %v906, 0.0
  %v1285 = vmax.f32 %v909, 0.0
  %v1286 = vmax.f32 %v914, 0.0
  %v1287 = vmax.f32 %v917, 0.0
  %v1288 = vmax.f32 %v922, 0.0
  %v1289 = vmax.f32 %v925, 0.0
  %v1290 = vmax.f32 %v930, 0.0
  %v1291 = vmax.f32 %v933, 0.0
  %v1292 = vmax.f32 %v938, 0.0
  %v1293 = vmax.f32 %v941, 0.0
  %v1294 = vmax.f32 %v946, 0.0
  %v1295 = vmax.f32 %v949, 0.0
  %v1296 = vmax.f32 %v954, 0.0
  %v1297 = vmax.f32 %v957, 0.0
  %v1298 = vmax.f32 %v962, 0.0
  %v1299 = vmax.f32 %v965, 0.0
  %v1300 = vmax.f32 %v970, 0.0
  %v1301 = vmax.f32 %v973, 0.0
  %v1302 = vmax.f32 %v978, 0.0
  %v1303 = vmax.f32 %v981, 0.0
  %v1304 = vmax.f32 %v986, 0.0
  %v1305 = vmax.f32 %v989, 0.0
  %v1306 = vmax.f32 %v994, 0.0
  %v1307 = vmax.f32 %v997, 0.0
  %v1308 = vmax.f32 %v1002, 0.0
  %v1309 = vmax.f32 %v1005, 0.0
  %v1310 = vmax.f32 %v1010, 0.0
  %v1311 = vmax.f32 %v1013, 0.0
  %v1312 = vmax.f32 %v1018, 0.0
  %v1313 = vmax.f32 %v1021, 0.0
  %v1314 = vmax.f32 %v1026, 0.0
  %v1315 = vmax.f32 %v1029, 0.0
  %v1316 = vmax.f32 %v1034, 0.0
  %v1317 = vmax.f32 %v1037, 0.0
  %v1318 = vmax.f32 %v1042, 0.0
  %v1319 = vmax.f32 %v1045, 0.0
  %v1320 = vmax.f32 %v1050, 0.0
  %v1321 = vmax.f32 %v1053, 0.0
  %v1322 = vmax.f32 %v1058, 0.0
  %v1323 = vmax.f32 %v1061, 0.0
  %v1324 = vmax.f32 %v1066, 0.0
  %v1325 = vmax.f32 %v1069, 0.0
  %v1326 = vmax.f32 %v1074, 0.0
  %v1327 = vmax.f32 %v1077, 0.0
  %v1328 = vmax.f32 %v1082, 0.0
  %v1329 = vmax.f32 %v1085, 0.0
  %v1330 = vmax.f32 %v1090, 0.0
  %v1331 = vmax.f32 %v1093, 0.0
  %v1332 = vmax.f32 %v1098, 0.0
  %v1333 = vmax.f32 %v1101, 0.0
  %v1334 = vmax.f32 %v1106, 0.0
  %v1335 = vmax.f32 %v1109, 0.0
  %v1336 = vmax.f32 %v1114, 0.0
  %v1337 = vmax.f32 %v1117, 0.0
  %v1338 = vmax.f32 %v1122, 0.0
  %v1339 = vmax.f32 %v1125, 0.0
  %v1340 = vmax.f32 %v1130, 0.0
  %v1341 = vmax.f32 %v1133, 0.0
  %v1342 = vmax.f32 %v1138, 0.0
  %v1343 = vmax.f32 %v1141, 0.0
  %v1344 = vmax.f32 %v1146, 0.0
  %v1345 = vmax.f32 %v1149, 0.0
  %v1346 = vmax.f32 %v1154, 0.0
  %v1347 = vmax.f32 %v1157, 0.0
  %v1348 = vmax.f32 %v1162, 0.0
  %v1349 = vmax.f32 %v1165, 0.0
  %v1350 = vmax.f32 %v1170, 0.0
  %v1351 = vmax.f32 %v1173, 0.0
  %v1352 = vmax.f32 %v1178, 0.0
  %v1353 = vmax.f32 %v1181, 0.0
  %v1354 = vmax.f32 %v1186, 0.0
  %v1355 = vmax.f32 %v1189, 0.0
  %v1356 = vmax.f32 %v1194, 0.0
  %v1357 = vmax.f32 %v1197, 0.0
  %v1358 = vmax.f32 %v1202, 0.0
  %v1359 = vmax.f32 %v1205, 0.0
  %v1360 = vmax.f32 %v1210, 0.0
  %v1361 = vmax.f32 %v1213, 0.0
  %v1362 = vmax.f32 %v1218, 0.0
  %v1363 = vmax.f32 %v1221, 0.0
  %v1364 = vmax.f32 %v1226, 0.0
  %v1365 = vmax.f32 %v1229, 0.0
  %v1366 = vmax.f32 %v1234, 0.0
  %v1367 = vmax.f32 %v1237, 0.0
  %v1368 = vpack.c.bf16 %v1241, %v1240
  %v1369 = vpack.c.bf16 %v1243, %v1242
  %v1370 = vpack.c.bf16 %v1245, %v1244
  %v1371 = vpack.c.bf16 %v1247, %v1246
  %v1372 = vpack.c.bf16 %v1249, %v1248
  %v1373 = vpack.c.bf16 %v1251, %v1250
  %v1374 = vpack.c.bf16 %v1253, %v1252
  %v1375 = vpack.c.bf16 %v1255, %v1254
  %v1376 = vpack.c.bf16 %v1257, %v1256
  %v1377 = vpack.c.bf16 %v1259, %v1258
  %v1378 = vpack.c.bf16 %v1261, %v1260
  %v1379 = vpack.c.bf16 %v1263, %v1262
  %v1380 = vpack.c.bf16 %v1265, %v1264
  %v1381 = vpack.c.bf16 %v1267, %v1266
  %v1382 = vpack.c.bf16 %v1269, %v1268
  %v1383 = vpack.c.bf16 %v1271, %v1270
  %v1384 = vpack.c.bf16 %v1273, %v1272
  %v1385 = vpack.c.bf16 %v1275, %v1274
  %v1386 = vpack.c.bf16 %v1277, %v1276
  %v1387 = vpack.c.bf16 %v1279, %v1278
  %v1388 = vpack.c.bf16 %v1281, %v1280
  %v1389 = vpack.c.bf16 %v1283, %v1282
  %v1390 = vpack.c.bf16 %v1285, %v1284
  %v1391 = vpack.c.bf16 %v1287, %v1286
  %v1392 = vpack.c.bf16 %v1289, %v1288
  %v1393 = vpack.c.bf16 %v1291, %v1290
  %v1394 = vpack.c.bf16 %v1293, %v1292
  %v1395 = vpack.c.bf16 %v1295, %v1294
  %v1396 = vpack.c.bf16 %v1297, %v1296
  %v1397 = vpack.c.bf16 %v1299, %v1298
  %v1398 = vpack.c.bf16 %v1301, %v1300
  %v1399 = vpack.c.bf16 %v1303, %v1302
  %v1400 = vpack.c.bf16 %v1305, %v1304
  %v1401 = vpack.c.bf16 %v1307, %v1306
  %v1402 = vpack.c.bf16 %v1309, %v1308
  %v1403 = vpack.c.bf16 %v1311, %v1310
  %v1404 = vpack.c.bf16 %v1313, %v1312
  %v1405 = vpack.c.bf16 %v1315, %v1314
  %v1406 = vpack.c.bf16 %v1317, %v1316
  %v1407 = vpack.c.bf16 %v1319, %v1318
  %v1408 = vpack.c.bf16 %v1321, %v1320
  %v1409 = vpack.c.bf16 %v1323, %v1322
  %v1410 = vpack.c.bf16 %v1325, %v1324
  %v1411 = vpack.c.bf16 %v1327, %v1326
  %v1412 = vpack.c.bf16 %v1329, %v1328
  %v1413 = vpack.c.bf16 %v1331, %v1330
  %v1414 = vpack.c.bf16 %v1333, %v1332
  %v1415 = vpack.c.bf16 %v1335, %v1334
  %v1416 = vpack.c.bf16 %v1337, %v1336
  %v1417 = vpack.c.bf16 %v1339, %v1338
  %v1418 = vpack.c.bf16 %v1341, %v1340
  %v1419 = vpack.c.bf16 %v1343, %v1342
  %v1420 = vpack.c.bf16 %v1345, %v1344
  %v1421 = vpack.c.bf16 %v1347, %v1346
  %v1422 = vpack.c.bf16 %v1349, %v1348
  %v1423 = vpack.c.bf16 %v1351, %v1350
  %v1424 = vpack.c.bf16 %v1353, %v1352
  %v1425 = vpack.c.bf16 %v1355, %v1354
  %v1426 = vpack.c.bf16 %v1357, %v1356
  %v1427 = vpack.c.bf16 %v1359, %v1358
  %v1428 = vpack.c.bf16 %v1361, %v1360
  %v1429 = vpack.c.bf16 %v1363, %v1362
  %v1430 = vpack.c.bf16 %v1365, %v1364
  %v1431 = vpack.c.bf16 %v1367, %v1366
  %v1496 = vunpack.c.l.b16 %v1368
  %v1497 = vunpack.c.h.b16 %v1368
  %v1498 = vunpack.c.l.b16 %v1369
  %v1499 = vunpack.c.h.b16 %v1369
  %v1500 = vunpack.c.l.b16 %v1370
  %v1501 = vunpack.c.h.b16 %v1370
  %v1502 = vunpack.c.l.b16 %v1371
  %v1503 = vunpack.c.h.b16 %v1371
  %v1504 = vunpack.c.l.b16 %v1372
  %v1505 = vunpack.c.h.b16 %v1372
  %v1506 = vunpack.c.l.b16 %v1373
  %v1507 = vunpack.c.h.b16 %v1373
  %v1508 = vunpack.c.l.b16 %v1374
  %v1509 = vunpack.c.h.b16 %v1374
  %v1510 = vunpack.c.l.b16 %v1375
  %v1511 = vunpack.c.h.b16 %v1375
  %v1512 = vunpack.c.l.b16 %v1376
  %v1513 = vunpack.c.h.b16 %v1376
  %v1514 = vunpack.c.l.b16 %v1377
  %v1515 = vunpack.c.h.b16 %v1377
  %v1516 = vunpack.c.l.b16 %v1378
  %v1517 = vunpack.c.h.b16 %v1378
  %v1518 = vunpack.c.l.b16 %v1379
  %v1519 = vunpack.c.h.b16 %v1379
  %v1520 = vunpack.c.l.b16 %v1380
  %v1521 = vunpack.c.h.b16 %v1380
  %v1522 = vunpack.c.l.b16 %v1381
  %v1523 = vunpack.c.h.b16 %v1381
  %v1524 = vunpack.c.l.b16 %v1382
  %v1525 = vunpack.c.h.b16 %v1382
  %v1526 = vunpack.c.l.b16 %v1383
  %v1527 = vunpack.c.h.b16 %v1383
  %v1528 = vunpack.c.l.b16 %v1384
  %v1529 = vunpack.c.h.b16 %v1384
  %v1530 = vunpack.c.l.b16 %v1385
  %v1531 = vunpack.c.h.b16 %v1385
  %v1532 = vunpack.c.l.b16 %v1386
  %v1533 = vunpack.c.h.b16 %v1386
  %v1534 = vunpack.c.l.b16 %v1387
  %v1535 = vunpack.c.h.b16 %v1387
  %v1536 = vunpack.c.l.b16 %v1388
  %v1537 = vunpack.c.h.b16 %v1388
  %v1538 = vunpack.c.l.b16 %v1389
  %v1539 = vunpack.c.h.b16 %v1389
  %v1540 = vunpack.c.l.b16 %v1390
  %v1541 = vunpack.c.h.b16 %v1390
  %v1542 = vunpack.c.l.b16 %v1391
  %v1543 = vunpack.c.h.b16 %v1391
  %v1544 = vunpack.c.l.b16 %v1392
  %v1545 = vunpack.c.h.b16 %v1392
  %v1546 = vunpack.c.l.b16 %v1393
  %v1547 = vunpack.c.h.b16 %v1393
  %v1548 = vunpack.c.l.b16 %v1394
  %v1549 = vunpack.c.h.b16 %v1394
  %v1550 = vunpack.c.l.b16 %v1395
  %v1551 = vunpack.c.h.b16 %v1395
  %v1552 = vunpack.c.l.b16 %v1396
  %v1553 = vunpack.c.h.b16 %v1396
  %v1554 = vunpack.c.l.b16 %v1397
  %v1555 = vunpack.c.h.b16 %v1397
  %v1556 = vunpack.c.l.b16 %v1398
  %v1557 = vunpack.c.h.b16 %v1398
  %v1558 = vunpack.c.l.b16 %v1399
  %v1559 = vunpack.c.h.b16 %v1399
  %v1560 = vunpack.c.l.b16 %v1400
  %v1561 = vunpack.c.h.b16 %v1400
  %v1562 = vunpack.c.l.b16 %v1401
  %v1563 = vunpack.c.h.b16 %v1401
  %v1564 = vunpack.c.l.b16 %v1402
  %v1565 = vunpack.c.h.b16 %v1402
  %v1566 = vunpack.c.l.b16 %v1403
  %v1567 = vunpack.c.h.b16 %v1403
  %v1568 = vunpack.c.l.b16 %v1404
  %v1569 = vunpack.c.h.b16 %v1404
  %v1570 = vunpack.c.l.b16 %v1405
  %v1571 = vunpack.c.h.b16 %v1405
  %v1572 = vunpack.c.l.b16 %v1406
  %v1573 = vunpack.c.h.b16 %v1406
  %v1574 = vunpack.c.l.b16 %v1407
  %v1575 = vunpack.c.h.b16 %v1407
  %v1576 = vunpack.c.l.b16 %v1408
  %v1577 = vunpack.c.h.b16 %v1408
  %v1578 = vunpack.c.l.b16 %v1409
  %v1579 = vunpack.c.h.b16 %v1409
  %v1580 = vunpack.c.l.b16 %v1410
  %v1581 = vunpack.c.h.b16 %v1410
  %v1582 = vunpack.c.l.b16 %v1411
  %v1583 = vunpack.c.h.b16 %v1411
  %v1584 = vunpack.c.l.b16 %v1412
  %v1585 = vunpack.c.h.b16 %v1412
  %v1586 = vunpack.c.l.b16 %v1413
  %v1587 = vunpack.c.h.b16 %v1413
  %v1588 = vunpack.c.l.b16 %v1414
  %v1589 = vunpack.c.h.b16 %v1414
  %v1590 = vunpack.c.l.b16 %v1415
  %v1591 = vunpack.c.h.b16 %v1415
  %v1592 = vunpack.c.l.b16 %v1416
  %v1593 = vunpack.c.h.b16 %v1416
  %v1594 = vunpack.c.l.b16 %v1417
  %v1595 = vunpack.c.h.b16 %v1417
  %v1596 = vunpack.c.l.b16 %v1418
  %v1597 = vunpack.c.h.b16 %v1418
  %v1598 = vunpack.c.l.b16 %v1419
  %v1599 = vunpack.c.h.b16 %v1419
  %v1600 = vunpack.c.l.b16 %v1420
  %v1601 = vunpack.c.h.b16 %v1420
  %v1602 = vunpack.c.l.b16 %v1421
  %v1603 = vunpack.c.h.b16 %v1421
  %v1604 = vunpack.c.l.b16 %v1422
  %v1605 = vunpack.c.h.b16 %v1422
  %v1606 = vunpack.c.l.b16 %v1423
  %v1607 = vunpack.c.h.b16 %v1423
  %v1608 = vunpack.c.l.b16 %v1424
  %v1609 = vunpack.c.h.b16 %v1424
  %v1610 = vunpack.c.l.b16 %v1425
  %v1611 = vunpack.c.h.b16 %v1425
  %v1612 = vunpack.c.l.b16 %v1426
  %v1613 = vunpack.c.h.b16 %v1426
  %v1614 = vunpack.c.l.b16 %v1427
  %v1615 = vunpack.c.h.b16 %v1427
  %v1616 = vunpack.c.l.b16 %v1428
  %v1617 = vunpack.c.h.b16 %v1428
  %v1618 = vunpack.c.l.b16 %v1429
  %v1619 = vunpack.c.h.b16 %v1429
  %v1620 = vunpack.c.l.b16 %v1430
  %v1621 = vunpack.c.h.b16 %v1430
  %v1622 = vunpack.c.l.b16 %v1431
  %v1623 = vunpack.c.h.b16 %v1431
  %v1624 = vpack.c.b16 %v1496, %v1496
  %v1625 = vpack.c.b16 %v1497, %v1497
  %v1626 = vpack.c.b16 %v1498, %v1498
  %v1627 = vpack.c.b16 %v1499, %v1499
  %v1628 = vpack.c.b16 %v1500, %v1500
  %v1629 = vpack.c.b16 %v1501, %v1501
  %v1630 = vpack.c.b16 %v1502, %v1502
  %v1631 = vpack.c.b16 %v1503, %v1503
  %v1632 = vpack.c.b16 %v1504, %v1504
  %v1633 = vpack.c.b16 %v1505, %v1505
  %v1634 = vpack.c.b16 %v1506, %v1506
  %v1635 = vpack.c.b16 %v1507, %v1507
  %v1636 = vpack.c.b16 %v1508, %v1508
  %v1637 = vpack.c.b16 %v1509, %v1509
  %v1638 = vpack.c.b16 %v1510, %v1510
  %v1639 = vpack.c.b16 %v1511, %v1511
  %v1640 = vpack.c.b16 %v1512, %v1512
  %v1641 = vpack.c.b16 %v1513, %v1513
  %v1642 = vpack.c.b16 %v1514, %v1514
  %v1643 = vpack.c.b16 %v1515, %v1515
  %v1644 = vpack.c.b16 %v1516, %v1516
  %v1645 = vpack.c.b16 %v1517, %v1517
  %v1646 = vpack.c.b16 %v1518, %v1518
  %v1647 = vpack.c.b16 %v1519, %v1519
  %v1648 = vpack.c.b16 %v1520, %v1520
  %v1649 = vpack.c.b16 %v1521, %v1521
  %v1650 = vpack.c.b16 %v1522, %v1522
  %v1651 = vpack.c.b16 %v1523, %v1523
  %v1652 = vpack.c.b16 %v1524, %v1524
  %v1653 = vpack.c.b16 %v1525, %v1525
  %v1654 = vpack.c.b16 %v1526, %v1526
  %v1655 = vpack.c.b16 %v1527, %v1527
  %v1656 = vpack.c.b16 %v1528, %v1528
  %v1657 = vpack.c.b16 %v1529, %v1529
  %v1658 = vpack.c.b16 %v1530, %v1530
  %v1659 = vpack.c.b16 %v1531, %v1531
  %v1660 = vpack.c.b16 %v1532, %v1532
  %v1661 = vpack.c.b16 %v1533, %v1533
  %v1662 = vpack.c.b16 %v1534, %v1534
  %v1663 = vpack.c.b16 %v1535, %v1535
  %v1664 = vpack.c.b16 %v1536, %v1536
  %v1665 = vpack.c.b16 %v1537, %v1537
  %v1666 = vpack.c.b16 %v1538, %v1538
  %v1667 = vpack.c.b16 %v1539, %v1539
  %v1668 = vpack.c.b16 %v1540, %v1540
  %v1669 = vpack.c.b16 %v1541, %v1541
  %v1670 = vpack.c.b16 %v1542, %v1542
  %v1671 = vpack.c.b16 %v1543, %v1543
  %v1672 = vpack.c.b16 %v1544, %v1544
  %v1673 = vpack.c.b16 %v1545, %v1545
  %v1674 = vpack.c.b16 %v1546, %v1546
  %v1675 = vpack.c.b16 %v1547, %v1547
  %v1676 = vpack.c.b16 %v1548, %v1548
  %v1677 = vpack.c.b16 %v1549, %v1549
  %v1678 = vpack.c.b16 %v1550, %v1550
  %v1679 = vpack.c.b16 %v1551, %v1551
  %v1680 = vpack.c.b16 %v1552, %v1552
  %v1681 = vpack.c.b16 %v1553, %v1553
  %v1682 = vpack.c.b16 %v1554, %v1554
  %v1683 = vpack.c.b16 %v1555, %v1555
  %v1684 = vpack.c.b16 %v1556, %v1556
  %v1685 = vpack.c.b16 %v1557, %v1557
  %v1686 = vpack.c.b16 %v1558, %v1558
  %v1687 = vpack.c.b16 %v1559, %v1559
  %v1688 = vpack.c.b16 %v1560, %v1560
  %v1689 = vpack.c.b16 %v1561, %v1561
  %v1690 = vpack.c.b16 %v1562, %v1562
  %v1691 = vpack.c.b16 %v1563, %v1563
  %v1692 = vpack.c.b16 %v1564, %v1564
  %v1693 = vpack.c.b16 %v1565, %v1565
  %v1694 = vpack.c.b16 %v1566, %v1566
  %v1695 = vpack.c.b16 %v1567, %v1567
  %v1696 = vpack.c.b16 %v1568, %v1568
  %v1697 = vpack.c.b16 %v1569, %v1569
  %v1698 = vpack.c.b16 %v1570, %v1570
  %v1699 = vpack.c.b16 %v1571, %v1571
  %v1700 = vpack.c.b16 %v1572, %v1572
  %v1701 = vpack.c.b16 %v1573, %v1573
  %v1702 = vpack.c.b16 %v1574, %v1574
  %v1703 = vpack.c.b16 %v1575, %v1575
  %v1704 = vpack.c.b16 %v1576, %v1576
  %v1705 = vpack.c.b16 %v1577, %v1577
  %v1706 = vpack.c.b16 %v1578, %v1578
  %v1707 = vpack.c.b16 %v1579, %v1579
  %v1708 = vpack.c.b16 %v1580, %v1580
  %v1709 = vpack.c.b16 %v1581, %v1581
  %v1710 = vpack.c.b16 %v1582, %v1582
  %v1711 = vpack.c.b16 %v1583, %v1583
  %v1712 = vpack.c.b16 %v1584, %v1584
  %v1713 = vpack.c.b16 %v1585, %v1585
  %v1714 = vpack.c.b16 %v1586, %v1586
  %v1715 = vpack.c.b16 %v1587, %v1587
  %v1716 = vpack.c.b16 %v1588, %v1588
  %v1717 = vpack.c.b16 %v1589, %v1589
  %v1718 = vpack.c.b16 %v1590, %v1590
  %v1719 = vpack.c.b16 %v1591, %v1591
  %v1720 = vpack.c.b16 %v1592, %v1592
  %v1721 = vpack.c.b16 %v1593, %v1593
  %v1722 = vpack.c.b16 %v1594, %v1594
  %v1723 = vpack.c.b16 %v1595, %v1595
  %v1724 = vpack.c.b16 %v1596, %v1596
  %v1725 = vpack.c.b16 %v1597, %v1597
  %v1726 = vpack.c.b16 %v1598, %v1598
  %v1727 = vpack.c.b16 %v1599, %v1599
  %v1728 = vpack.c.b16 %v1600, %v1600
  %v1729 = vpack.c.b16 %v1601, %v1601
  %v1730 = vpack.c.b16 %v1602, %v1602
  %v1731 = vpack.c.b16 %v1603, %v1603
  %v1732 = vpack.c.b16 %v1604, %v1604
  %v1733 = vpack.c.b16 %v1605, %v1605
  %v1734 = vpack.c.b16 %v1606, %v1606
  %v1735 = vpack.c.b16 %v1607, %v1607
  %v1736 = vpack.c.b16 %v1608, %v1608
  %v1737 = vpack.c.b16 %v1609, %v1609
  %v1738 = vpack.c.b16 %v1610, %v1610
  %v1739 = vpack.c.b16 %v1611, %v1611
  %v1740 = vpack.c.b16 %v1612, %v1612
  %v1741 = vpack.c.b16 %v1613, %v1613
  %v1742 = vpack.c.b16 %v1614, %v1614
  %v1743 = vpack.c.b16 %v1615, %v1615
  %v1744 = vpack.c.b16 %v1616, %v1616
  %v1745 = vpack.c.b16 %v1617, %v1617
  %v1746 = vpack.c.b16 %v1618, %v1618
  %v1747 = vpack.c.b16 %v1619, %v1619
  %v1748 = vpack.c.b16 %v1620, %v1620
  %v1749 = vpack.c.b16 %v1621, %v1621
  %v1750 = vpack.c.b16 %v1622, %v1622
  %v1751 = vpack.c.b16 %v1623, %v1623
  %1880 = vst [vmem:[%s3] sm:$0xf] %v1624
  %1881 = vst [vmem:[%s3 + $0x4] sm:$0xf] %v1625
  %1882 = vst [vmem:[%s3 + $0x8] sm:$0xf] %v1626
  %1883 = vst [vmem:[%s3 + $0xc] sm:$0xf] %v1627
  %1884 = vst [vmem:[%s3 + $0x10] sm:$0xf] %v1628
  %1885 = vst [vmem:[%s3 + $0x14] sm:$0xf] %v1629
  %1886 = vst [vmem:[%s3 + $0x18] sm:$0xf] %v1630
  %1887 = vst [vmem:[%s3 + $0x1c] sm:$0xf] %v1631
  %1888 = vst [vmem:[%s3 + $0x20] sm:$0xf] %v1632
  %1889 = vst [vmem:[%s3 + $0x24] sm:$0xf] %v1633
  %1890 = vst [vmem:[%s3 + $0x28] sm:$0xf] %v1634
  %1891 = vst [vmem:[%s3 + $0x2c] sm:$0xf] %v1635
  %1892 = vst [vmem:[%s3 + $0x30] sm:$0xf] %v1636
  %1893 = vst [vmem:[%s3 + $0x34] sm:$0xf] %v1637
  %1894 = vst [vmem:[%s3 + $0x38] sm:$0xf] %v1638
  %1895 = vst [vmem:[%s3 + $0x3c] sm:$0xf] %v1639
  %1896 = vst [vmem:[%s3 + $0x40] sm:$0xf] %v1640
  %1897 = vst [vmem:[%s3 + $0x44] sm:$0xf] %v1641
  %1898 = vst [vmem:[%s3 + $0x48] sm:$0xf] %v1642
  %1899 = vst [vmem:[%s3 + $0x4c] sm:$0xf] %v1643
  %1900 = vst [vmem:[%s3 + $0x50] sm:$0xf] %v1644
  %1901 = vst [vmem:[%s3 + $0x54] sm:$0xf] %v1645
  %1902 = vst [vmem:[%s3 + $0x58] sm:$0xf] %v1646
  %1903 = vst [vmem:[%s3 + $0x5c] sm:$0xf] %v1647
  %1904 = vst [vmem:[%s3 + $0x60] sm:$0xf] %v1648
  %1905 = vst [vmem:[%s3 + $0x64] sm:$0xf] %v1649
  %1906 = vst [vmem:[%s3 + $0x68] sm:$0xf] %v1650
  %1907 = vst [vmem:[%s3 + $0x6c] sm:$0xf] %v1651
  %1908 = vst [vmem:[%s3 + $0x70] sm:$0xf] %v1652
  %1909 = vst [vmem:[%s3 + $0x74] sm:$0xf] %v1653
  %1910 = vst [vmem:[%s3 + $0x78] sm:$0xf] %v1654
  %1911 = vst [vmem:[%s3 + $0x7c] sm:$0xf] %v1655
  %1912 = vst [vmem:[%s3 + $0x80] sm:$0xf] %v1656
  %1913 = vst [vmem:[%s3 + $0x84] sm:$0xf] %v1657
  %1914 = vst [vmem:[%s3 + $0x88] sm:$0xf] %v1658
  %1915 = vst [vmem:[%s3 + $0x8c] sm:$0xf] %v1659
  %1916 = vst [vmem:[%s3 + $0x90] sm:$0xf] %v1660
  %1917 = vst [vmem:[%s3 + $0x94] sm:$0xf] %v1661
  %1918 = vst [vmem:[%s3 + $0x98] sm:$0xf] %v1662
  %1919 = vst [vmem:[%s3 + $0x9c] sm:$0xf] %v1663
  %1920 = vst [vmem:[%s3 + $0xa0] sm:$0xf] %v1664
  %1921 = vst [vmem:[%s3 + $0xa4] sm:$0xf] %v1665
  %1922 = vst [vmem:[%s3 + $0xa8] sm:$0xf] %v1666
  %1923 = vst [vmem:[%s3 + $0xac] sm:$0xf] %v1667
  %1924 = vst [vmem:[%s3 + $0xb0] sm:$0xf] %v1668
  %1925 = vst [vmem:[%s3 + $0xb4] sm:$0xf] %v1669
  %1926 = vst [vmem:[%s3 + $0xb8] sm:$0xf] %v1670
  %1927 = vst [vmem:[%s3 + $0xbc] sm:$0xf] %v1671
  %1928 = vst [vmem:[%s3 + $0xc0] sm:$0xf] %v1672
  %1929 = vst [vmem:[%s3 + $0xc4] sm:$0xf] %v1673
  %1930 = vst [vmem:[%s3 + $0xc8] sm:$0xf] %v1674
  %1931 = vst [vmem:[%s3 + $0xcc] sm:$0xf] %v1675
  %1932 = vst [vmem:[%s3 + $0xd0] sm:$0xf] %v1676
  %1933 = vst [vmem:[%s3 + $0xd4] sm:$0xf] %v1677
  %1934 = vst [vmem:[%s3 + $0xd8] sm:$0xf] %v1678
  %1935 = vst [vmem:[%s3 + $0xdc] sm:$0xf] %v1679
  %1936 = vst [vmem:[%s3 + $0xe0] sm:$0xf] %v1680
  %1937 = vst [vmem:[%s3 + $0xe4] sm:$0xf] %v1681
  %1938 = vst [vmem:[%s3 + $0xe8] sm:$0xf] %v1682
  %1939 = vst [vmem:[%s3 + $0xec] sm:$0xf] %v1683
  %1940 = vst [vmem:[%s3 + $0xf0] sm:$0xf] %v1684
  %1941 = vst [vmem:[%s3 + $0xf4] sm:$0xf] %v1685
  %1942 = vst [vmem:[%s3 + $0xf8] sm:$0xf] %v1686
  %1943 = vst [vmem:[%s3 + $0xfc] sm:$0xf] %v1687
  %1944 = vst [vmem:[%s3 + $0x100] sm:$0xf] %v1688
  %1945 = vst [vmem:[%s3 + $0x104] sm:$0xf] %v1689
  %1946 = vst [vmem:[%s3 + $0x108] sm:$0xf] %v1690
  %1947 = vst [vmem:[%s3 + $0x10c] sm:$0xf] %v1691
  %1948 = vst [vmem:[%s3 + $0x110] sm:$0xf] %v1692
  %1949 = vst [vmem:[%s3 + $0x114] sm:$0xf] %v1693
  %1950 = vst [vmem:[%s3 + $0x118] sm:$0xf] %v1694
  %1951 = vst [vmem:[%s3 + $0x11c] sm:$0xf] %v1695
  %1952 = vst [vmem:[%s3 + $0x120] sm:$0xf] %v1696
  %1953 = vst [vmem:[%s3 + $0x124] sm:$0xf] %v1697
  %1954 = vst [vmem:[%s3 + $0x128] sm:$0xf] %v1698
  %1955 = vst [vmem:[%s3 + $0x12c] sm:$0xf] %v1699
  %1956 = vst [vmem:[%s3 + $0x130] sm:$0xf] %v1700
  %1957 = vst [vmem:[%s3 + $0x134] sm:$0xf] %v1701
  %1958 = vst [vmem:[%s3 + $0x138] sm:$0xf] %v1702
  %1959 = vst [vmem:[%s3 + $0x13c] sm:$0xf] %v1703
  %1960 = vst [vmem:[%s3 + $0x140] sm:$0xf] %v1704
  %1961 = vst [vmem:[%s3 + $0x144] sm:$0xf] %v1705
  %1962 = vst [vmem:[%s3 + $0x148] sm:$0xf] %v1706
  %1963 = vst [vmem:[%s3 + $0x14c] sm:$0xf] %v1707
  %1964 = vst [vmem:[%s3 + $0x150] sm:$0xf] %v1708
  %1965 = vst [vmem:[%s3 + $0x154] sm:$0xf] %v1709
  %1966 = vst [vmem:[%s3 + $0x158] sm:$0xf] %v1710
  %1967 = vst [vmem:[%s3 + $0x15c] sm:$0xf] %v1711
  %1968 = vst [vmem:[%s3 + $0x160] sm:$0xf] %v1712
  %1969 = vst [vmem:[%s3 + $0x164] sm:$0xf] %v1713
  %1970 = vst [vmem:[%s3 + $0x168] sm:$0xf] %v1714
  %1971 = vst [vmem:[%s3 + $0x16c] sm:$0xf] %v1715
  %1972 = vst [vmem:[%s3 + $0x170] sm:$0xf] %v1716
  %1973 = vst [vmem:[%s3 + $0x174] sm:$0xf] %v1717
  %1974 = vst [vmem:[%s3 + $0x178] sm:$0xf] %v1718
  %1975 = vst [vmem:[%s3 + $0x17c] sm:$0xf] %v1719
  %1976 = vst [vmem:[%s3 + $0x180] sm:$0xf] %v1720
  %1977 = vst [vmem:[%s3 + $0x184] sm:$0xf] %v1721
  %1978 = vst [vmem:[%s3 + $0x188] sm:$0xf] %v1722
  %1979 = vst [vmem:[%s3 + $0x18c] sm:$0xf] %v1723
  %1980 = vst [vmem:[%s3 + $0x190] sm:$0xf] %v1724
  %1981 = vst [vmem:[%s3 + $0x194] sm:$0xf] %v1725
  %1982 = vst [vmem:[%s3 + $0x198] sm:$0xf] %v1726
  %1983 = vst [vmem:[%s3 + $0x19c] sm:$0xf] %v1727
  %1984 = vst [vmem:[%s3 + $0x1a0] sm:$0xf] %v1728
  %1985 = vst [vmem:[%s3 + $0x1a4] sm:$0xf] %v1729
  %1986 = vst [vmem:[%s3 + $0x1a8] sm:$0xf] %v1730
  %1987 = vst [vmem:[%s3 + $0x1ac] sm:$0xf] %v1731
  %1988 = vst [vmem:[%s3 + $0x1b0] sm:$0xf] %v1732
  %1989 = vst [vmem:[%s3 + $0x1b4] sm:$0xf] %v1733
  %1990 = vst [vmem:[%s3 + $0x1b8] sm:$0xf] %v1734
  %1991 = vst [vmem:[%s3 + $0x1bc] sm:$0xf] %v1735
  %1992 = vst [vmem:[%s3 + $0x1c0] sm:$0xf] %v1736
  %1993 = vst [vmem:[%s3 + $0x1c4] sm:$0xf] %v1737
  %1994 = vst [vmem:[%s3 + $0x1c8] sm:$0xf] %v1738
  %1995 = vst [vmem:[%s3 + $0x1cc] sm:$0xf] %v1739
  %1996 = vst [vmem:[%s3 + $0x1d0] sm:$0xf] %v1740
  %1997 = vst [vmem:[%s3 + $0x1d4] sm:$0xf] %v1741
  %1998 = vst [vmem:[%s3 + $0x1d8] sm:$0xf] %v1742
  %1999 = vst [vmem:[%s3 + $0x1dc] sm:$0xf] %v1743
  %2000 = vst [vmem:[%s3 + $0x1e0] sm:$0xf] %v1744
  %2001 = vst [vmem:[%s3 + $0x1e4] sm:$0xf] %v1745
  %2002 = vst [vmem:[%s3 + $0x1e8] sm:$0xf] %v1746
  %2003 = vst [vmem:[%s3 + $0x1ec] sm:$0xf] %v1747
  %2004 = vst [vmem:[%s3 + $0x1f0] sm:$0xf] %v1748
  %2005 = vst [vmem:[%s3 + $0x1f4] sm:$0xf] %v1749
  %2006 = vst [vmem:[%s3 + $0x1f8] sm:$0xf] %v1750
  %2007 = vst [vmem:[%s3 + $0x1fc] sm:$0xf] %v1751
  // Predicated region
  $region14: #{net_forward.6} parent=0 // pred_check
    _
  $region15: #{net_forward.6} parent=0 // pred_check_branch
    %2009 = sbr.rel (0) target = $region17
  $region16: #{net_forward.6} parent=0 // pred_region
    _
  $region17: #{net_forward.6} parent=0 // pred_fallthru
    _
  // Predicated region
  $region18: #{net_forward.6} parent=0 // pred_check
    _
  $region19: #{net_forward.6} parent=0 // pred_check_branch
    %2011 = sbr.rel (0) target = $region21
  $region20: #{net_forward.6} parent=0 // pred_region
    _
  $region21: #{net_forward.6} parent=0 // pred_fallthru
    _

// kernel: net_forward.7
$region0: #{net_forward.7}
  #allocation0 [shape = 'u32[]', space=smem, size = 0x4, offset = 0x4, fixed_abs, tag = 'smem constant byte address 0x4 - core index']
  #allocation1 [shape = 'u32[144,128]{1,0:T(1,128)}', space=vmem, size = 0x12000, scoped, tag = 'internal scratch']
  %s0 = inlined_call_operand.vmem [shape: bf16[128,896], index: 0, kind: input, shape index: {}]
  %s1 = inlined_call_operand.vmem [shape: bf16[896,128], index: 1, kind: input, shape index: {}]
  %s2 = inlined_call_operand.vmem [shape: f32[1,128], index: 2, kind: input, shape index: {}]
  %s3 = inlined_call_operand.vmem [shape: bf16[128,128], index: 3, kind: output, shape index: {}]
  %s4 = sld [smem:[#allocation0]]
  $region22: #{net_forward.7} parent=0
    _
  %s6 = ssub.s32 1, %s4
  %s7 = scalar_select 0, %s6, %s4
  // Predicated region
  $region2: #{net_forward.7} parent=0 // pred_check
    _
  $region3: #{net_forward.7} parent=0 // pred_check_branch
    %9 = sbr.rel (0) target = $region5
  $region4: #{net_forward.7} parent=0 // pred_region
    _
  $region5: #{net_forward.7} parent=0 // pred_fallthru
    _
  // Predicated region
  $region6: #{net_forward.7} parent=0 // pred_check
    _
  $region7: #{net_forward.7} parent=0 // pred_check_branch
    %11 = sbr.rel (0) target = $region9
  $region8: #{net_forward.7} parent=0 // pred_region
    _
  $region9: #{net_forward.7} parent=0 // pred_fallthru
    _
  // Predicated region
  $region10: #{net_forward.7} parent=0 // pred_check
    _
  $region11: #{net_forward.7} parent=0 // pred_check_branch
    %13 = sbr.rel (0) target = $region13
  $region12: #{net_forward.7} parent=0 // pred_region
    _
  $region13: #{net_forward.7} parent=0 // pred_fallthru
    _
  %v15 = vld [vmem:[%s0] sm:$0xff]
  %v16 = vld [vmem:[%s0 + $0x8] sm:$0xff]
  %v17 = vld [vmem:[%s0 + $0x10] sm:$0xff]
  %v18 = vld [vmem:[%s0 + $0x18] sm:$0xf]
  %v19 = vld [vmem:[%s0 + $0x1c] sm:$0xff]
  %v20 = vld [vmem:[%s0 + $0x24] sm:$0xff]
  %v21 = vld [vmem:[%s0 + $0x2c] sm:$0xff]
  %v22 = vld [vmem:[%s0 + $0x34] sm:$0xf]
  %v23 = vld [vmem:[%s0 + $0x38] sm:$0xff]
  %v24 = vld [vmem:[%s0 + $0x40] sm:$0xff]
  %v25 = vld [vmem:[%s0 + $0x48] sm:$0xff]
  %v26 = vld [vmem:[%s0 + $0x50] sm:$0xf]
  %v27 = vld [vmem:[%s0 + $0x54] sm:$0xff]
  %v28 = vld [vmem:[%s0 + $0x5c] sm:$0xff]
  %v29 = vld [vmem:[%s0 + $0x64] sm:$0xff]
  %v30 = vld [vmem:[%s0 + $0x6c] sm:$0xf]
  %v31 = vld [vmem:[%s0 + $0x70] sm:$0xff]
  %v32 = vld [vmem:[%s0 + $0x78] sm:$0xff]
  %v33 = vld [vmem:[%s0 + $0x80] sm:$0xff]
  %v34 = vld [vmem:[%s0 + $0x88] sm:$0xf]
  %v35 = vld [vmem:[%s0 + $0x8c] sm:$0xff]
  %v36 = vld [vmem:[%s0 + $0x94] sm:$0xff]
  %v37 = vld [vmem:[%s0 + $0x9c] sm:$0xff]
  %v38 = vld [vmem:[%s0 + $0xa4] sm:$0xf]
  %v39 = vld [vmem:[%s0 + $0xa8] sm:$0xff]
  %v40 = vld [vmem:[%s0 + $0xb0] sm:$0xff]
  %v41 = vld [vmem:[%s0 + $0xb8] sm:$0xff]
  %v42 = vld [vmem:[%s0 + $0xc0] sm:$0xf]
  %v43 = vld [vmem:[%s0 + $0xc4] sm:$0xff]
  %v44 = vld [vmem:[%s0 + $0xcc] sm:$0xff]
  %v45 = vld [vmem:[%s0 + $0xd4] sm:$0xff]
  %v46 = vld [vmem:[%s0 + $0xdc] sm:$0xf]
  %v47 = vld [vmem:[%s0 + $0xe0] sm:$0xff]
  %v48 = vld [vmem:[%s0 + $0xe8] sm:$0xff]
  %v49 = vld [vmem:[%s0 + $0xf0] sm:$0xff]
  %v50 = vld [vmem:[%s0 + $0xf8] sm:$0xf]
  %v51 = vld [vmem:[%s0 + $0xfc] sm:$0xff]
  %v52 = vld [vmem:[%s0 + $0x104] sm:$0xff]
  %v53 = vld [vmem:[%s0 + $0x10c] sm:$0xff]
  %v54 = vld [vmem:[%s0 + $0x114] sm:$0xf]
  %v55 = vld [vmem:[%s0 + $0x118] sm:$0xff]
  %v56 = vld [vmem:[%s0 + $0x120] sm:$0xff]
  %v57 = vld [vmem:[%s0 + $0x128] sm:$0xff]
  %v58 = vld [vmem:[%s0 + $0x130] sm:$0xf]
  %v59 = vld [vmem:[%s0 + $0x134] sm:$0xff]
  %v60 = vld [vmem:[%s0 + $0x13c] sm:$0xff]
  %v61 = vld [vmem:[%s0 + $0x144] sm:$0xff]
  %v62 = vld [vmem:[%s0 + $0x14c] sm:$0xf]
  %v63 = vld [vmem:[%s0 + $0x150] sm:$0xff]
  %v64 = vld [vmem:[%s0 + $0x158] sm:$0xff]
  %v65 = vld [vmem:[%s0 + $0x160] sm:$0xff]
  %v66 = vld [vmem:[%s0 + $0x168] sm:$0xf]
  %v67 = vld [vmem:[%s0 + $0x16c] sm:$0xff]
  %v68 = vld [vmem:[%s0 + $0x174] sm:$0xff]
  %v69 = vld [vmem:[%s0 + $0x17c] sm:$0xff]
  %v70 = vld [vmem:[%s0 + $0x184] sm:$0xf]
  %v71 = vld [vmem:[%s0 + $0x188] sm:$0xff]
  %v72 = vld [vmem:[%s0 + $0x190] sm:$0xff]
  %v73 = vld [vmem:[%s0 + $0x198] sm:$0xff]
  %v74 = vld [vmem:[%s0 + $0x1a0] sm:$0xf]
  %v75 = vld [vmem:[%s0 + $0x1a4] sm:$0xff]
  %v76 = vld [vmem:[%s0 + $0x1ac] sm:$0xff]
  %v77 = vld [vmem:[%s0 + $0x1b4] sm:$0xff]
  %v78 = vld [vmem:[%s0 + $0x1bc] sm:$0xf]
  %v79 = vld [vmem:[%s1] sm:$0xf]
  %v80 = vld [vmem:[%s1 + $0x4] sm:$0xf]
  %v81 = vld [vmem:[%s1 + $0x8] sm:$0xf]
  %v82 = vld [vmem:[%s1 + $0xc] sm:$0xf]
  %v83 = vld [vmem:[%s1 + $0x10] sm:$0xf]
  %v84 = vld [vmem:[%s1 + $0x14] sm:$0xf]
  %v85 = vld [vmem:[%s1 + $0x18] sm:$0xf]
  %v86 = vld [vmem:[%s1 + $0x1c] sm:$0xf]
  %v87 = vld [vmem:[%s1 + $0x20] sm:$0xf]
  %v88 = vld [vmem:[%s1 + $0x24] sm:$0xf]
  %v89 = vld [vmem:[%s1 + $0x28] sm:$0xf]
  %v90 = vld [vmem:[%s1 + $0x2c] sm:$0xf]
  %v91 = vld [vmem:[%s1 + $0x30] sm:$0xf]
  %v92 = vld [vmem:[%s1 + $0x34] sm:$0xf]
  %v93 = vld [vmem:[%s1 + $0x38] sm:$0xf]
  %v94 = vld [vmem:[%s1 + $0x3c] sm:$0xf]
  %v95 = vld [vmem:[%s1 + $0x40] sm:$0xf]
  %v96 = vld [vmem:[%s1 + $0x44] sm:$0xf]
  %v97 = vld [vmem:[%s1 + $0x48] sm:$0xf]
  %v98 = vld [vmem:[%s1 + $0x4c] sm:$0xf]
  %v99 = vld [vmem:[%s1 + $0x50] sm:$0xf]
  %v100 = vld [vmem:[%s1 + $0x54] sm:$0xf]
  %v101 = vld [vmem:[%s1 + $0x58] sm:$0xf]
  %v102 = vld [vmem:[%s1 + $0x5c] sm:$0xf]
  %v103 = vld [vmem:[%s1 + $0x60] sm:$0xf]
  %v104 = vld [vmem:[%s1 + $0x64] sm:$0xf]
  %v105 = vld [vmem:[%s1 + $0x68] sm:$0xf]
  %v106 = vld [vmem:[%s1 + $0x6c] sm:$0xf]
  %v107 = vld [vmem:[%s1 + $0x70] sm:$0xf]
  %v108 = vld [vmem:[%s1 + $0x74] sm:$0xf]
  %v109 = vld [vmem:[%s1 + $0x78] sm:$0xf]
  %v110 = vld [vmem:[%s1 + $0x7c] sm:$0xf]
  %v111 = vld [vmem:[%s1 + $0x80] sm:$0xf]
  %v112 = vld [vmem:[%s1 + $0x84] sm:$0xf]
  %v113 = vld [vmem:[%s1 + $0x88] sm:$0xf]
  %v114 = vld [vmem:[%s1 + $0x8c] sm:$0xf]
  %v115 = vld [vmem:[%s1 + $0x90] sm:$0xf]
  %v116 = vld [vmem:[%s1 + $0x94] sm:$0xf]
  %v117 = vld [vmem:[%s1 + $0x98] sm:$0xf]
  %v118 = vld [vmem:[%s1 + $0x9c] sm:$0xf]
  %v119 = vld [vmem:[%s1 + $0xa0] sm:$0xf]
  %v120 = vld [vmem:[%s1 + $0xa4] sm:$0xf]
  %v121 = vld [vmem:[%s1 + $0xa8] sm:$0xf]
  %v122 = vld [vmem:[%s1 + $0xac] sm:$0xf]
  %v123 = vld [vmem:[%s1 + $0xb0] sm:$0xf]
  %v124 = vld [vmem:[%s1 + $0xb4] sm:$0xf]
  %v125 = vld [vmem:[%s1 + $0xb8] sm:$0xf]
  %v126 = vld [vmem:[%s1 + $0xbc] sm:$0xf]
  %v127 = vld [vmem:[%s1 + $0xc0] sm:$0xf]
  %v128 = vld [vmem:[%s1 + $0xc4] sm:$0xf]
  %v129 = vld [vmem:[%s1 + $0xc8] sm:$0xf]
  %v130 = vld [vmem:[%s1 + $0xcc] sm:$0xf]
  %v131 = vld [vmem:[%s1 + $0xd0] sm:$0xf]
  %v132 = vld [vmem:[%s1 + $0xd4] sm:$0xf]
  %v133 = vld [vmem:[%s1 + $0xd8] sm:$0xf]
  %v134 = vld [vmem:[%s1 + $0xdc] sm:$0xf]
  %v135 = vld [vmem:[%s1 + $0xe0] sm:$0xf]
  %v136 = vld [vmem:[%s1 + $0xe4] sm:$0xf]
  %v137 = vld [vmem:[%s1 + $0xe8] sm:$0xf]
  %v138 = vld [vmem:[%s1 + $0xec] sm:$0xf]
  %v139 = vld [vmem:[%s1 + $0xf0] sm:$0xf]
  %v140 = vld [vmem:[%s1 + $0xf4] sm:$0xf]
  %v141 = vld [vmem:[%s1 + $0xf8] sm:$0xf]
  %v142 = vld [vmem:[%s1 + $0xfc] sm:$0xf]
  %v143 = vld [vmem:[%s1 + $0x100] sm:$0xf]
  %v144 = vld [vmem:[%s1 + $0x104] sm:$0xf]
  %v145 = vld [vmem:[%s1 + $0x108] sm:$0xf]
  %v146 = vld [vmem:[%s1 + $0x10c] sm:$0xf]
  %v147 = vld [vmem:[%s1 + $0x110] sm:$0xf]
  %v148 = vld [vmem:[%s1 + $0x114] sm:$0xf]
  %v149 = vld [vmem:[%s1 + $0x118] sm:$0xf]
  %v150 = vld [vmem:[%s1 + $0x11c] sm:$0xf]
  %v151 = vld [vmem:[%s1 + $0x120] sm:$0xf]
  %v152 = vld [vmem:[%s1 + $0x124] sm:$0xf]
  %v153 = vld [vmem:[%s1 + $0x128] sm:$0xf]
  %v154 = vld [vmem:[%s1 + $0x12c] sm:$0xf]
  %v155 = vld [vmem:[%s1 + $0x130] sm:$0xf]
  %v156 = vld [vmem:[%s1 + $0x134] sm:$0xf]
  %v157 = vld [vmem:[%s1 + $0x138] sm:$0xf]
  %v158 = vld [vmem:[%s1 + $0x13c] sm:$0xf]
  %v159 = vld [vmem:[%s1 + $0x140] sm:$0xf]
  %v160 = vld [vmem:[%s1 + $0x144] sm:$0xf]
  %v161 = vld [vmem:[%s1 + $0x148] sm:$0xf]
  %v162 = vld [vmem:[%s1 + $0x14c] sm:$0xf]
  %v163 = vld [vmem:[%s1 + $0x150] sm:$0xf]
  %v164 = vld [vmem:[%s1 + $0x154] sm:$0xf]
  %v165 = vld [vmem:[%s1 + $0x158] sm:$0xf]
  %v166 = vld [vmem:[%s1 + $0x15c] sm:$0xf]
  %v167 = vld [vmem:[%s1 + $0x160] sm:$0xf]
  %v168 = vld [vmem:[%s1 + $0x164] sm:$0xf]
  %v169 = vld [vmem:[%s1 + $0x168] sm:$0xf]
  %v170 = vld [vmem:[%s1 + $0x16c] sm:$0xf]
  %v171 = vld [vmem:[%s1 + $0x170] sm:$0xf]
  %v172 = vld [vmem:[%s1 + $0x174] sm:$0xf]
  %v173 = vld [vmem:[%s1 + $0x178] sm:$0xf]
  %v174 = vld [vmem:[%s1 + $0x17c] sm:$0xf]
  %v175 = vld [vmem:[%s1 + $0x180] sm:$0xf]
  %v176 = vld [vmem:[%s1 + $0x184] sm:$0xf]
  %v177 = vld [vmem:[%s1 + $0x188] sm:$0xf]
  %v178 = vld [vmem:[%s1 + $0x18c] sm:$0xf]
  %v179 = vld [vmem:[%s1 + $0x190] sm:$0xf]
  %v180 = vld [vmem:[%s1 + $0x194] sm:$0xf]
  %v181 = vld [vmem:[%s1 + $0x198] sm:$0xf]
  %v182 = vld [vmem:[%s1 + $0x19c] sm:$0xf]
  %v183 = vld [vmem:[%s1 + $0x1a0] sm:$0xf]
  %v184 = vld [vmem:[%s1 + $0x1a4] sm:$0xf]
  %v185 = vld [vmem:[%s1 + $0x1a8] sm:$0xf]
  %v186 = vld [vmem:[%s1 + $0x1ac] sm:$0xf]
  %v187 = vld [vmem:[%s1 + $0x1b0] sm:$0xf]
  %v188 = vld [vmem:[%s1 + $0x1b4] sm:$0xf]
  %v189 = vld [vmem:[%s1 + $0x1b8] sm:$0xf]
  %v190 = vld [vmem:[%s1 + $0x1bc] sm:$0xf]
  %v191 = vld [vmem:[%s2] sm:$0x1]
  %v193 = vlaneseq
  %v194 = vshrl.u32 %v193, 7
  %v195 = vsub.s32 0, %v194
  %v196 = vrot.slane %v191, %v195
  %v262 = vunpack.c.l.b16 %v15
  %v263 = vunpack.c.h.b16 %v15
  %v264 = vunpack.c.l.b16 %v16
  %v265 = vunpack.c.h.b16 %v16
  %v266 = vunpack.c.l.b16 %v17
  %v267 = vunpack.c.h.b16 %v17
  %v268 = vunpack.c.l.b16 %v18
  %v269 = vunpack.c.l.b16 %v19
  %v270 = vunpack.c.h.b16 %v19
  %v271 = vunpack.c.l.b16 %v20
  %v272 = vunpack.c.h.b16 %v20
  %v273 = vunpack.c.l.b16 %v21
  %v274 = vunpack.c.h.b16 %v21
  %v275 = vunpack.c.l.b16 %v22
  %v276 = vunpack.c.l.b16 %v23
  %v277 = vunpack.c.h.b16 %v23
  %v278 = vunpack.c.l.b16 %v24
  %v279 = vunpack.c.h.b16 %v24
  %v280 = vunpack.c.l.b16 %v25
  %v281 = vunpack.c.h.b16 %v25
  %v282 = vunpack.c.l.b16 %v26
  %v283 = vunpack.c.l.b16 %v27
  %v284 = vunpack.c.h.b16 %v27
  %v285 = vunpack.c.l.b16 %v28
  %v286 = vunpack.c.h.b16 %v28
  %v287 = vunpack.c.l.b16 %v29
  %v288 = vunpack.c.h.b16 %v29
  %v289 = vunpack.c.l.b16 %v30
  %v290 = vunpack.c.l.b16 %v31
  %v291 = vunpack.c.h.b16 %v31
  %v292 = vunpack.c.l.b16 %v32
  %v293 = vunpack.c.h.b16 %v32
  %v294 = vunpack.c.l.b16 %v33
  %v295 = vunpack.c.h.b16 %v33
  %v296 = vunpack.c.l.b16 %v34
  %v297 = vunpack.c.l.b16 %v35
  %v298 = vunpack.c.h.b16 %v35
  %v299 = vunpack.c.l.b16 %v36
  %v300 = vunpack.c.h.b16 %v36
  %v301 = vunpack.c.l.b16 %v37
  %v302 = vunpack.c.h.b16 %v37
  %v303 = vunpack.c.l.b16 %v38
  %v304 = vunpack.c.l.b16 %v39
  %v305 = vunpack.c.h.b16 %v39
  %v306 = vunpack.c.l.b16 %v40
  %v307 = vunpack.c.h.b16 %v40
  %v308 = vunpack.c.l.b16 %v41
  %v309 = vunpack.c.h.b16 %v41
  %v310 = vunpack.c.l.b16 %v42
  %v311 = vunpack.c.l.b16 %v43
  %v312 = vunpack.c.h.b16 %v43
  %v313 = vunpack.c.l.b16 %v44
  %v314 = vunpack.c.h.b16 %v44
  %v315 = vunpack.c.l.b16 %v45
  %v316 = vunpack.c.h.b16 %v45
  %v317 = vunpack.c.l.b16 %v46
  %v318 = vunpack.c.l.b16 %v47
  %v319 = vunpack.c.h.b16 %v47
  %v320 = vunpack.c.l.b16 %v48
  %v321 = vunpack.c.h.b16 %v48
  %v322 = vunpack.c.l.b16 %v49
  %v323 = vunpack.c.h.b16 %v49
  %v324 = vunpack.c.l.b16 %v50
  %v325 = vunpack.c.l.b16 %v51
  %v326 = vunpack.c.h.b16 %v51
  %v327 = vunpack.c.l.b16 %v52
  %v328 = vunpack.c.h.b16 %v52
  %v329 = vunpack.c.l.b16 %v53
  %v330 = vunpack.c.h.b16 %v53
  %v331 = vunpack.c.l.b16 %v54
  %v332 = vunpack.c.l.b16 %v55
  %v333 = vunpack.c.h.b16 %v55
  %v334 = vunpack.c.l.b16 %v56
  %v335 = vunpack.c.h.b16 %v56
  %v336 = vunpack.c.l.b16 %v57
  %v337 = vunpack.c.h.b16 %v57
  %v338 = vunpack.c.l.b16 %v58
  %v339 = vunpack.c.l.b16 %v59
  %v340 = vunpack.c.h.b16 %v59
  %v341 = vunpack.c.l.b16 %v60
  %v342 = vunpack.c.h.b16 %v60
  %v343 = vunpack.c.l.b16 %v61
  %v344 = vunpack.c.h.b16 %v61
  %v345 = vunpack.c.l.b16 %v62
  %v346 = vunpack.c.l.b16 %v63
  %v347 = vunpack.c.h.b16 %v63
  %v348 = vunpack.c.l.b16 %v64
  %v349 = vunpack.c.h.b16 %v64
  %v350 = vunpack.c.l.b16 %v65
  %v351 = vunpack.c.h.b16 %v65
  %v352 = vunpack.c.l.b16 %v66
  %v353 = vunpack.c.l.b16 %v67
  %v354 = vunpack.c.h.b16 %v67
  %v355 = vunpack.c.l.b16 %v68
  %v356 = vunpack.c.h.b16 %v68
  %v357 = vunpack.c.l.b16 %v69
  %v358 = vunpack.c.h.b16 %v69
  %v359 = vunpack.c.l.b16 %v70
  %v360 = vunpack.c.l.b16 %v71
  %v361 = vunpack.c.h.b16 %v71
  %v362 = vunpack.c.l.b16 %v72
  %v363 = vunpack.c.h.b16 %v72
  %v364 = vunpack.c.l.b16 %v73
  %v365 = vunpack.c.h.b16 %v73
  %v366 = vunpack.c.l.b16 %v74
  %v367 = vunpack.c.l.b16 %v75
  %v368 = vunpack.c.h.b16 %v75
  %v369 = vunpack.c.l.b16 %v76
  %v370 = vunpack.c.h.b16 %v76
  %v371 = vunpack.c.l.b16 %v77
  %v372 = vunpack.c.h.b16 %v77
  %v373 = vunpack.c.l.b16 %v78
  %v374 = vpack.c.b16 %v269, %v262
  %v375 = vpack.c.b16 %v270, %v263
  %v376 = vpack.c.b16 %v271, %v264
  %v377 = vpack.c.b16 %v272, %v265
  %v378 = vpack.c.b16 %v273, %v266
  %v379 = vpack.c.b16 %v274, %v267
  %v380 = vpack.c.b16 %v275, %v268
  %v381 = vpack.c.b16 %v283, %v276
  %v382 = vpack.c.b16 %v284, %v277
  %v383 = vpack.c.b16 %v285, %v278
  %v384 = vpack.c.b16 %v286, %v279
  %v385 = vpack.c.b16 %v287, %v280
  %v386 = vpack.c.b16 %v288, %v281
  %v387 = vpack.c.b16 %v289, %v282
  %v388 = vpack.c.b16 %v297, %v290
  %v389 = vpack.c.b16 %v298, %v291
  %v390 = vpack.c.b16 %v299, %v292
  %v391 = vpack.c.b16 %v300, %v293
  %v392 = vpack.c.b16 %v301, %v294
  %v393 = vpack.c.b16 %v302, %v295
  %v394 = vpack.c.b16 %v303, %v296
  %v395 = vpack.c.b16 %v311, %v304
  %v396 = vpack.c.b16 %v312, %v305
  %v397 = vpack.c.b16 %v313, %v306
  %v398 = vpack.c.b16 %v314, %v307
  %v399 = vpack.c.b16 %v315, %v308
  %v400 = vpack.c.b16 %v316, %v309
  %v401 = vpack.c.b16 %v317, %v310
  %v402 = vpack.c.b16 %v325, %v318
  %v403 = vpack.c.b16 %v326, %v319
  %v404 = vpack.c.b16 %v327, %v320
  %v405 = vpack.c.b16 %v328, %v321
  %v406 = vpack.c.b16 %v329, %v322
  %v407 = vpack.c.b16 %v330, %v323
  %v408 = vpack.c.b16 %v331, %v324
  %v409 = vpack.c.b16 %v339, %v332
  %v410 = vpack.c.b16 %v340, %v333
  %v411 = vpack.c.b16 %v341, %v334
  %v412 = vpack.c.b16 %v342, %v335
  %v413 = vpack.c.b16 %v343, %v336
  %v414 = vpack.c.b16 %v344, %v337
  %v415 = vpack.c.b16 %v345, %v338
  %v416 = vpack.c.b16 %v353, %v346
  %v417 = vpack.c.b16 %v354, %v347
  %v418 = vpack.c.b16 %v355, %v348
  %v419 = vpack.c.b16 %v356, %v349
  %v420 = vpack.c.b16 %v357, %v350
  %v421 = vpack.c.b16 %v358, %v351
  %v422 = vpack.c.b16 %v359, %v352
  %v423 = vpack.c.b16 %v367, %v360
  %v424 = vpack.c.b16 %v368, %v361
  %v425 = vpack.c.b16 %v369, %v362
  %v426 = vpack.c.b16 %v370, %v363
  %v427 = vpack.c.b16 %v371, %v364
  %v428 = vpack.c.b16 %v372, %v365
  %v429 = vpack.c.b16 %v373, %v366
  %v598 = vunpack.c.l.b16 %v79
  %v599 = vunpack.c.l.b16 %v80
  %v600 = vunpack.c.l.b16 %v81
  %v601 = vunpack.c.l.b16 %v82
  %v602 = vunpack.c.l.b16 %v83
  %v603 = vunpack.c.l.b16 %v84
  %v604 = vunpack.c.l.b16 %v85
  %v605 = vunpack.c.l.b16 %v86
  %v606 = vunpack.c.l.b16 %v87
  %v607 = vunpack.c.l.b16 %v88
  %v608 = vunpack.c.l.b16 %v89
  %v609 = vunpack.c.l.b16 %v90
  %v610 = vunpack.c.l.b16 %v91
  %v611 = vunpack.c.l.b16 %v92
  %v612 = vunpack.c.l.b16 %v93
  %v613 = vunpack.c.l.b16 %v94
  %v614 = vunpack.c.l.b16 %v95
  %v615 = vunpack.c.l.b16 %v96
  %v616 = vunpack.c.l.b16 %v97
  %v617 = vunpack.c.l.b16 %v98
  %v618 = vunpack.c.l.b16 %v99
  %v619 = vunpack.c.l.b16 %v100
  %v620 = vunpack.c.l.b16 %v101
  %v621 = vunpack.c.l.b16 %v102
  %v622 = vunpack.c.l.b16 %v103
  %v623 = vunpack.c.l.b16 %v104
  %v624 = vunpack.c.l.b16 %v105
  %v625 = vunpack.c.l.b16 %v106
  %v626 = vunpack.c.l.b16 %v107
  %v627 = vunpack.c.l.b16 %v108
  %v628 = vunpack.c.l.b16 %v109
  %v629 = vunpack.c.l.b16 %v110
  %v630 = vunpack.c.l.b16 %v111
  %v631 = vunpack.c.l.b16 %v112
  %v632 = vunpack.c.l.b16 %v113
  %v633 = vunpack.c.l.b16 %v114
  %v634 = vunpack.c.l.b16 %v115
  %v635 = vunpack.c.l.b16 %v116
  %v636 = vunpack.c.l.b16 %v117
  %v637 = vunpack.c.l.b16 %v118
  %v638 = vunpack.c.l.b16 %v119
  %v639 = vunpack.c.l.b16 %v120
  %v640 = vunpack.c.l.b16 %v121
  %v641 = vunpack.c.l.b16 %v122
  %v642 = vunpack.c.l.b16 %v123
  %v643 = vunpack.c.l.b16 %v124
  %v644 = vunpack.c.l.b16 %v125
  %v645 = vunpack.c.l.b16 %v126
  %v646 = vunpack.c.l.b16 %v127
  %v647 = vunpack.c.l.b16 %v128
  %v648 = vunpack.c.l.b16 %v129
  %v649 = vunpack.c.l.b16 %v130
  %v650 = vunpack.c.l.b16 %v131
  %v651 = vunpack.c.l.b16 %v132
  %v652 = vunpack.c.l.b16 %v133
  %v653 = vunpack.c.l.b16 %v134
  %v654 = vunpack.c.l.b16 %v135
  %v655 = vunpack.c.l.b16 %v136
  %v656 = vunpack.c.l.b16 %v137
  %v657 = vunpack.c.l.b16 %v138
  %v658 = vunpack.c.l.b16 %v139
  %v659 = vunpack.c.l.b16 %v140
  %v660 = vunpack.c.l.b16 %v141
  %v661 = vunpack.c.l.b16 %v142
  %v662 = vunpack.c.l.b16 %v143
  %v663 = vunpack.c.l.b16 %v144
  %v664 = vunpack.c.l.b16 %v145
  %v665 = vunpack.c.l.b16 %v146
  %v666 = vunpack.c.l.b16 %v147
  %v667 = vunpack.c.l.b16 %v148
  %v668 = vunpack.c.l.b16 %v149
  %v669 = vunpack.c.l.b16 %v150
  %v670 = vunpack.c.l.b16 %v151
  %v671 = vunpack.c.l.b16 %v152
  %v672 = vunpack.c.l.b16 %v153
  %v673 = vunpack.c.l.b16 %v154
  %v674 = vunpack.c.l.b16 %v155
  %v675 = vunpack.c.l.b16 %v156
  %v676 = vunpack.c.l.b16 %v157
  %v677 = vunpack.c.l.b16 %v158
  %v678 = vunpack.c.l.b16 %v159
  %v679 = vunpack.c.l.b16 %v160
  %v680 = vunpack.c.l.b16 %v161
  %v681 = vunpack.c.l.b16 %v162
  %v682 = vunpack.c.l.b16 %v163
  %v683 = vunpack.c.l.b16 %v164
  %v684 = vunpack.c.l.b16 %v165
  %v685 = vunpack.c.l.b16 %v166
  %v686 = vunpack.c.l.b16 %v167
  %v687 = vunpack.c.l.b16 %v168
  %v688 = vunpack.c.l.b16 %v169
  %v689 = vunpack.c.l.b16 %v170
  %v690 = vunpack.c.l.b16 %v171
  %v691 = vunpack.c.l.b16 %v172
  %v692 = vunpack.c.l.b16 %v173
  %v693 = vunpack.c.l.b16 %v174
  %v694 = vunpack.c.l.b16 %v175
  %v695 = vunpack.c.l.b16 %v176
  %v696 = vunpack.c.l.b16 %v177
  %v697 = vunpack.c.l.b16 %v178
  %v698 = vunpack.c.l.b16 %v179
  %v699 = vunpack.c.l.b16 %v180
  %v700 = vunpack.c.l.b16 %v181
  %v701 = vunpack.c.l.b16 %v182
  %v702 = vunpack.c.l.b16 %v183
  %v703 = vunpack.c.l.b16 %v184
  %v704 = vunpack.c.l.b16 %v185
  %v705 = vunpack.c.l.b16 %v186
  %v706 = vunpack.c.l.b16 %v187
  %v707 = vunpack.c.l.b16 %v188
  %v708 = vunpack.c.l.b16 %v189
  %v709 = vunpack.c.l.b16 %v190
  %v710 = vpack.c.b16 %v599, %v598
  %v711 = vpack.c.b16 %v601, %v600
  %v712 = vpack.c.b16 %v603, %v602
  %v713 = vpack.c.b16 %v605, %v604
  %v714 = vpack.c.b16 %v607, %v606
  %v715 = vpack.c.b16 %v609, %v608
  %v716 = vpack.c.b16 %v611, %v610
  %v717 = vpack.c.b16 %v613, %v612
  %v718 = vpack.c.b16 %v615, %v614
  %v719 = vpack.c.b16 %v617, %v616
  %v720 = vpack.c.b16 %v619, %v618
  %v721 = vpack.c.b16 %v621, %v620
  %v722 = vpack.c.b16 %v623, %v622
  %v723 = vpack.c.b16 %v625, %v624
  %v724 = vpack.c.b16 %v627, %v626
  %v725 = vpack.c.b16 %v629, %v628
  %v726 = vpack.c.b16 %v631, %v630
  %v727 = vpack.c.b16 %v633, %v632
  %v728 = vpack.c.b16 %v635, %v634
  %v729 = vpack.c.b16 %v637, %v636
  %v730 = vpack.c.b16 %v639, %v638
  %v731 = vpack.c.b16 %v641, %v640
  %v732 = vpack.c.b16 %v643, %v642
  %v733 = vpack.c.b16 %v645, %v644
  %v734 = vpack.c.b16 %v647, %v646
  %v735 = vpack.c.b16 %v649, %v648
  %v736 = vpack.c.b16 %v651, %v650
  %v737 = vpack.c.b16 %v653, %v652
  %v738 = vpack.c.b16 %v655, %v654
  %v739 = vpack.c.b16 %v657, %v656
  %v740 = vpack.c.b16 %v659, %v658
  %v741 = vpack.c.b16 %v661, %v660
  %v742 = vpack.c.b16 %v663, %v662
  %v743 = vpack.c.b16 %v665, %v664
  %v744 = vpack.c.b16 %v667, %v666
  %v745 = vpack.c.b16 %v669, %v668
  %v746 = vpack.c.b16 %v671, %v670
  %v747 = vpack.c.b16 %v673, %v672
  %v748 = vpack.c.b16 %v675, %v674
  %v749 = vpack.c.b16 %v677, %v676
  %v750 = vpack.c.b16 %v679, %v678
  %v751 = vpack.c.b16 %v681, %v680
  %v752 = vpack.c.b16 %v683, %v682
  %v753 = vpack.c.b16 %v685, %v684
  %v754 = vpack.c.b16 %v687, %v686
  %v755 = vpack.c.b16 %v689, %v688
  %v756 = vpack.c.b16 %v691, %v690
  %v757 = vpack.c.b16 %v693, %v692
  %v758 = vpack.c.b16 %v695, %v694
  %v759 = vpack.c.b16 %v697, %v696
  %v760 = vpack.c.b16 %v699, %v698
  %v761 = vpack.c.b16 %v701, %v700
  %v762 = vpack.c.b16 %v703, %v702
  %v763 = vpack.c.b16 %v705, %v704
  %v764 = vpack.c.b16 %v707, %v706
  %v765 = vpack.c.b16 %v709, %v708
  %822 = vmatprep.subr.bf16.mxu0 0
  %823 = vmatpush1.bf16.msra.mxu0 %v710
  %824 = vmatprep.subr.bf16.mxu0 0
  %825 = vmatpush1.bf16.msra.mxu0 %v711
  %826 = vmatprep.subr.bf16.mxu0 0
  %827 = vmatpush1.bf16.msra.mxu0 %v712
  %828 = vmatprep.subr.bf16.mxu0 0
  %829 = vmatpush1.bf16.msra.mxu0 %v713
  %830 = vmatprep.subr.bf16.mxu0 0
  %831 = vmatpush1.bf16.msra.mxu0 %v714
  %832 = vmatprep.subr.bf16.mxu0 0
  %833 = vmatpush1.bf16.msra.mxu0 %v715
  %834 = vmatprep.subr.bf16.mxu0 0
  %835 = vmatpush1.bf16.msra.mxu0 %v716
  %836 = vmatprep.subr.bf16.mxu0 0
  %837 = vmatpush1.bf16.msra.mxu0 %v717
  %838 = vmatprep.subr.bf16.mxu0 0
  %839 = vmatpush1.bf16.msra.mxu0 %v718
  %840 = vmatprep.subr.bf16.mxu0 0
  %841 = vmatpush1.bf16.msra.mxu0 %v719
  %842 = vmatprep.subr.bf16.mxu0 0
  %843 = vmatpush1.bf16.msra.mxu0 %v720
  %844 = vmatprep.subr.bf16.mxu0 0
  %845 = vmatpush1.bf16.msra.mxu0 %v721
  %846 = vmatprep.subr.bf16.mxu0 0
  %847 = vmatpush1.bf16.msra.mxu0 %v722
  %848 = vmatprep.subr.bf16.mxu0 0
  %849 = vmatpush1.bf16.msra.mxu0 %v723
  %850 = vmatprep.subr.bf16.mxu0 0
  %851 = vmatpush1.bf16.msra.mxu0 %v724
  %852 = vmatprep.subr.bf16.mxu0 0
  %853 = vmatpush1.bf16.msra.mxu0 %v725
  %854 = vmatprep.mubr.bf16.mxu0 %v375
  %855 = vmatmul.mubr.bf16.gmra.mrb[0].mxu0 %v374
  %v856 = vpop.f32.mrb[0].mxu0
  %v857 = vadd.f32 %v196, %v856
  %v858 = vpop.f32.mrb[0].mxu0
  %v859 = vpop.f32.mrb[0].mxu0
  %v860 = vadd.f32 %v196, %v859
  %v861 = vpop.f32.mrb[0].mxu0
  %862 = vmatprep.mubr.bf16.mxu0 %v382
  %863 = vmatmul.mubr.bf16.gmra.mrb[0].mxu0 %v381
  %v864 = vpop.f32.mrb[0].mxu0
  %v865 = vadd.f32 %v196, %v864
  %v866 = vpop.f32.mrb[0].mxu0
  %v867 = vpop.f32.mrb[0].mxu0
  %v868 = vadd.f32 %v196, %v867
  %v869 = vpop.f32.mrb[0].mxu0
  %870 = vmatprep.mubr.bf16.mxu0 %v389
  %871 = vmatmul.mubr.bf16.gmra.mrb[0].mxu0 %v388
  %v872 = vpop.f32.mrb[0].mxu0
  %v873 = vadd.f32 %v196, %v872
  %v874 = vpop.f32.mrb[0].mxu0
  %v875 = vpop.f32.mrb[0].mxu0
  %v876 = vadd.f32 %v196, %v875
  %v877 = vpop.f32.mrb[0].mxu0
  %878 = vmatprep.mubr.bf16.mxu0 %v396
  %879 = vmatmul.mubr.bf16.gmra.mrb[0].mxu0 %v395
  %v880 = vpop.f32.mrb[0].mxu0
  %v881 = vadd.f32 %v196, %v880
  %v882 = vpop.f32.mrb[0].mxu0
  %v883 = vpop.f32.mrb[0].mxu0
  %v884 = vadd.f32 %v196, %v883
  %v885 = vpop.f32.mrb[0].mxu0
  %886 = vmatprep.mubr.bf16.mxu0 %v403
  %887 = vmatmul.mubr.bf16.gmra.mrb[0].mxu0 %v402
  %v888 = vpop.f32.mrb[0].mxu0
  %v889 = vadd.f32 %v196, %v888
  %v890 = vpop.f32.mrb[0].mxu0
  %v891 = vpop.f32.mrb[0].mxu0
  %v892 = vadd.f32 %v196, %v891
  %v893 = vpop.f32.mrb[0].mxu0
  %894 = vmatprep.mubr.bf16.mxu0 %v410
  %895 = vmatmul.mubr.bf16.gmra.mrb[0].mxu0 %v409
  %v896 = vpop.f32.mrb[0].mxu0
  %v897 = vadd.f32 %v196, %v896
  %v898 = vpop.f32.mrb[0].mxu0
  %v899 = vpop.f32.mrb[0].mxu0
  %v900 = vadd.f32 %v196, %v899
  %v901 = vpop.f32.mrb[0].mxu0
  %902 = vmatprep.mubr.bf16.mxu0 %v417
  %903 = vmatmul.mubr.bf16.gmra.mrb[0].mxu0 %v416
  %v904 = vpop.f32.mrb[0].mxu0
  %v905 = vadd.f32 %v196, %v904
  %v906 = vpop.f32.mrb[0].mxu0
  %v907 = vpop.f32.mrb[0].mxu0
  %v908 = vadd.f32 %v196, %v907
  %v909 = vpop.f32.mrb[0].mxu0
  %910 = vmatprep.mubr.bf16.mxu0 %v424
  %911 = vmatmul.mubr.bf16.gmra.mrb[0].mxu0 %v423
  %v912 = vpop.f32.mrb[0].mxu0
  %v913 = vadd.f32 %v196, %v912
  %v914 = vpop.f32.mrb[0].mxu0
  %v915 = vpop.f32.mrb[0].mxu0
  %v916 = vadd.f32 %v196, %v915
  %v917 = vpop.f32.mrb[0].mxu0
  %918 = vdwg.mxu0
  %919 = vmatprep.subr.bf16.mxu0 0
  %920 = vmatpush1.bf16.msra.mxu0 %v726
  %921 = vmatprep.subr.bf16.mxu0 0
  %922 = vmatpush1.bf16.msra.mxu0 %v727
  %923 = vmatprep.subr.bf16.mxu0 0
  %924 = vmatpush1.bf16.msra.mxu0 %v728
  %925 = vmatprep.subr.bf16.mxu0 0
  %926 = vmatpush1.bf16.msra.mxu0 %v729
  %927 = vmatprep.subr.bf16.mxu0 0
  %928 = vmatpush1.bf16.msra.mxu0 %v730
  %929 = vmatprep.subr.bf16.mxu0 0
  %930 = vmatpush1.bf16.msra.mxu0 %v731
  %931 = vmatprep.subr.bf16.mxu0 0
  %932 = vmatpush1.bf16.msra.mxu0 %v732
  %933 = vmatprep.subr.bf16.mxu0 0
  %934 = vmatpush1.bf16.msra.mxu0 %v733
  %935 = vmatprep.subr.bf16.mxu0 0
  %936 = vmatpush1.bf16.msra.mxu0 %v734
  %937 = vmatprep.subr.bf16.mxu0 0
  %938 = vmatpush1.bf16.msra.mxu0 %v735
  %939 = vmatprep.subr.bf16.mxu0 0
  %940 = vmatpush1.bf16.msra.mxu0 %v736
  %941 = vmatprep.subr.bf16.mxu0 0
  %942 = vmatpush1.bf16.msra.mxu0 %v737
  %943 = vmatprep.subr.bf16.mxu0 0
  %944 = vmatpush1.bf16.msra.mxu0 %v738
  %945 = vmatprep.subr.bf16.mxu0 0
  %946 = vmatpush1.bf16.msra.mxu0 %v739
  %947 = vmatprep.subr.bf16.mxu0 0
  %948 = vmatpush1.bf16.msra.mxu0 %v740
  %949 = vmatprep.subr.bf16.mxu0 0
  %950 = vmatpush1.bf16.msra.mxu0 %v741
  %951 = vmatprep.mubr.bf16.mxu0 %v377
  %952 = vmatmul.mubr.bf16.gmra.mrb[0].mxu0 %v376
  %v953 = vpop.f32.mrb[0].mxu0
  %v954 = vadd.f32 %v857, %v953
  %v955 = vpop.f32.mrb[0].mxu0
  %v956 = vpop.f32.mrb[0].mxu0
  %v957 = vadd.f32 %v860, %v956
  %v958 = vpop.f32.mrb[0].mxu0
  %959 = vmatprep.mubr.bf16.mxu0 %v384
  %960 = vmatmul.mubr.bf16.gmra.mrb[0].mxu0 %v383
  %v961 = vpop.f32.mrb[0].mxu0
  %v962 = vadd.f32 %v865, %v961
  %v963 = vpop.f32.mrb[0].mxu0
  %v964 = vpop.f32.mrb[0].mxu0
  %v965 = vadd.f32 %v868, %v964
  %v966 = vpop.f32.mrb[0].mxu0
  %967 = vmatprep.mubr.bf16.mxu0 %v391
  %968 = vmatmul.mubr.bf16.gmra.mrb[0].mxu0 %v390
  %v969 = vpop.f32.mrb[0].mxu0
  %v970 = vadd.f32 %v873, %v969
  %v971 = vpop.f32.mrb[0].mxu0
  %v972 = vpop.f32.mrb[0].mxu0
  %v973 = vadd.f32 %v876, %v972
  %v974 = vpop.f32.mrb[0].mxu0
  %975 = vmatprep.mubr.bf16.mxu0 %v398
  %976 = vmatmul.mubr.bf16.gmra.mrb[0].mxu0 %v397
  %v977 = vpop.f32.mrb[0].mxu0
  %v978 = vadd.f32 %v881, %v977
  %v979 = vpop.f32.mrb[0].mxu0
  %v980 = vpop.f32.mrb[0].mxu0
  %v981 = vadd.f32 %v884, %v980
  %v982 = vpop.f32.mrb[0].mxu0
  %983 = vmatprep.mubr.bf16.mxu0 %v405
  %984 = vmatmul.mubr.bf16.gmra.mrb[0].mxu0 %v404
  %v985 = vpop.f32.mrb[0].mxu0
  %v986 = vadd.f32 %v889, %v985
  %v987 = vpop.f32.mrb[0].mxu0
  %v988 = vpop.f32.mrb[0].mxu0
  %v989 = vadd.f32 %v892, %v988
  %v990 = vpop.f32.mrb[0].mxu0
  %991 = vmatprep.mubr.bf16.mxu0 %v412
  %992 = vmatmul.mubr.bf16.gmra.mrb[0].mxu0 %v411
  %v993 = vpop.f32.mrb[0].mxu0
  %v994 = vadd.f32 %v897, %v993
  %v995 = vpop.f32.mrb[0].mxu0
  %v996 = vpop.f32.mrb[0].mxu0
  %v997 = vadd.f32 %v900, %v996
  %v998 = vpop.f32.mrb[0].mxu0
  %999 = vmatprep.mubr.bf16.mxu0 %v419
  %1000 = vmatmul.mubr.bf16.gmra.mrb[0].mxu0 %v418
  %v1001 = vpop.f32.mrb[0].mxu0
  %v1002 = vadd.f32 %v905, %v1001
  %v1003 = vpop.f32.mrb[0].mxu0
  %v1004 = vpop.f32.mrb[0].mxu0
  %v1005 = vadd.f32 %v908, %v1004
  %v1006 = vpop.f32.mrb[0].mxu0
  %1007 = vmatprep.mubr.bf16.mxu0 %v426
  %1008 = vmatmul.mubr.bf16.gmra.mrb[0].mxu0 %v425
  %v1009 = vpop.f32.mrb[0].mxu0
  %v1010 = vadd.f32 %v913, %v1009
  %v1011 = vpop.f32.mrb[0].mxu0
  %v1012 = vpop.f32.mrb[0].mxu0
  %v1013 = vadd.f32 %v916, %v1012
  %v1014 = vpop.f32.mrb[0].mxu0
  %1015 = vdwg.mxu0
  %1016 = vmatprep.subr.bf16.mxu0 0
  %1017 = vmatpush1.bf16.msra.mxu0 %v742
  %1018 = vmatprep.subr.bf16.mxu0 0
  %1019 = vmatpush1.bf16.msra.mxu0 %v743
  %1020 = vmatprep.subr.bf16.mxu0 0
  %1021 = vmatpush1.bf16.msra.mxu0 %v744
  %1022 = vmatprep.subr.bf16.mxu0 0
  %1023 = vmatpush1.bf16.msra.mxu0 %v745
  %1024 = vmatprep.subr.bf16.mxu0 0
  %1025 = vmatpush1.bf16.msra.mxu0 %v746
  %1026 = vmatprep.subr.bf16.mxu0 0
  %1027 = vmatpush1.bf16.msra.mxu0 %v747
  %1028 = vmatprep.subr.bf16.mxu0 0
  %1029 = vmatpush1.bf16.msra.mxu0 %v748
  %1030 = vmatprep.subr.bf16.mxu0 0
  %1031 = vmatpush1.bf16.msra.mxu0 %v749
  %1032 = vmatprep.subr.bf16.mxu0 0
  %1033 = vmatpush1.bf16.msra.mxu0 %v750
  %1034 = vmatprep.subr.bf16.mxu0 0
  %1035 = vmatpush1.bf16.msra.mxu0 %v751
  %1036 = vmatprep.subr.bf16.mxu0 0
  %1037 = vmatpush1.bf16.msra.mxu0 %v752
  %1038 = vmatprep.subr.bf16.mxu0 0
  %1039 = vmatpush1.bf16.msra.mxu0 %v753
  %1040 = vmatprep.subr.bf16.mxu0 0
  %1041 = vmatpush1.bf16.msra.mxu0 %v754
  %1042 = vmatprep.subr.bf16.mxu0 0
  %1043 = vmatpush1.bf16.msra.mxu0 %v755
  %1044 = vmatprep.subr.bf16.mxu0 0
  %1045 = vmatpush1.bf16.msra.mxu0 %v756
  %1046 = vmatprep.subr.bf16.mxu0 0
  %1047 = vmatpush1.bf16.msra.mxu0 %v757
  %1048 = vmatprep.mubr.bf16.mxu0 %v379
  %1049 = vmatmul.mubr.bf16.gmra.mrb[0].mxu0 %v378
  %v1050 = vpop.f32.mrb[0].mxu0
  %v1051 = vadd.f32 %v954, %v1050
  %v1052 = vpop.f32.mrb[0].mxu0
  %v1053 = vpop.f32.mrb[0].mxu0
  %v1054 = vadd.f32 %v957, %v1053
  %v1055 = vpop.f32.mrb[0].mxu0
  %1056 = vmatprep.mubr.bf16.mxu0 %v386
  %1057 = vmatmul.mubr.bf16.gmra.mrb[0].mxu0 %v385
  %v1058 = vpop.f32.mrb[0].mxu0
  %v1059 = vadd.f32 %v962, %v1058
  %v1060 = vpop.f32.mrb[0].mxu0
  %v1061 = vpop.f32.mrb[0].mxu0
  %v1062 = vadd.f32 %v965, %v1061
  %v1063 = vpop.f32.mrb[0].mxu0
  %1064 = vmatprep.mubr.bf16.mxu0 %v393
  %1065 = vmatmul.mubr.bf16.gmra.mrb[0].mxu0 %v392
  %v1066 = vpop.f32.mrb[0].mxu0
  %v1067 = vadd.f32 %v970, %v1066
  %v1068 = vpop.f32.mrb[0].mxu0
  %v1069 = vpop.f32.mrb[0].mxu0
  %v1070 = vadd.f32 %v973, %v1069
  %v1071 = vpop.f32.mrb[0].mxu0
  %1072 = vmatprep.mubr.bf16.mxu0 %v400
  %1073 = vmatmul.mubr.bf16.gmra.mrb[0].mxu0 %v399
  %v1074 = vpop.f32.mrb[0].mxu0
  %v1075 = vadd.f32 %v978, %v1074
  %v1076 = vpop.f32.mrb[0].mxu0
  %v1077 = vpop.f32.mrb[0].mxu0
  %v1078 = vadd.f32 %v981, %v1077
  %v1079 = vpop.f32.mrb[0].mxu0
  %1080 = vmatprep.mubr.bf16.mxu0 %v407
  %1081 = vmatmul.mubr.bf16.gmra.mrb[0].mxu0 %v406
  %v1082 = vpop.f32.mrb[0].mxu0
  %v1083 = vadd.f32 %v986, %v1082
  %v1084 = vpop.f32.mrb[0].mxu0
  %v1085 = vpop.f32.mrb[0].mxu0
  %v1086 = vadd.f32 %v989, %v1085
  %v1087 = vpop.f32.mrb[0].mxu0
  %1088 = vmatprep.mubr.bf16.mxu0 %v414
  %1089 = vmatmul.mubr.bf16.gmra.mrb[0].mxu0 %v413
  %v1090 = vpop.f32.mrb[0].mxu0
  %v1091 = vadd.f32 %v994, %v1090
  %v1092 = vpop.f32.mrb[0].mxu0
  %v1093 = vpop.f32.mrb[0].mxu0
  %v1094 = vadd.f32 %v997, %v1093
  %v1095 = vpop.f32.mrb[0].mxu0
  %1096 = vmatprep.mubr.bf16.mxu0 %v421
  %1097 = vmatmul.mubr.bf16.gmra.mrb[0].mxu0 %v420
  %v1098 = vpop.f32.mrb[0].mxu0
  %v1099 = vadd.f32 %v1002, %v1098
  %v1100 = vpop.f32.mrb[0].mxu0
  %v1101 = vpop.f32.mrb[0].mxu0
  %v1102 = vadd.f32 %v1005, %v1101
  %v1103 = vpop.f32.mrb[0].mxu0
  %1104 = vmatprep.mubr.bf16.mxu0 %v428
  %1105 = vmatmul.mubr.bf16.gmra.mrb[0].mxu0 %v427
  %v1106 = vpop.f32.mrb[0].mxu0
  %v1107 = vadd.f32 %v1010, %v1106
  %v1108 = vpop.f32.mrb[0].mxu0
  %v1109 = vpop.f32.mrb[0].mxu0
  %v1110 = vadd.f32 %v1013, %v1109
  %v1111 = vpop.f32.mrb[0].mxu0
  %1112 = vdwg.mxu0
  %1113 = vmatprep.subr.bf16.mxu0 0
  %1114 = vmatpush1.bf16.msra.mxu0 %v758
  %1115 = vmatprep.subr.bf16.mxu0 0
  %1116 = vmatpush1.bf16.msra.mxu0 %v759
  %1117 = vmatprep.subr.bf16.mxu0 0
  %1118 = vmatpush1.bf16.msra.mxu0 %v760
  %1119 = vmatprep.subr.bf16.mxu0 0
  %1120 = vmatpush1.bf16.msra.mxu0 %v761
  %1121 = vmatprep.subr.bf16.mxu0 0
  %1122 = vmatpush1.bf16.msra.mxu0 %v762
  %1123 = vmatprep.subr.bf16.mxu0 0
  %1124 = vmatpush1.bf16.msra.mxu0 %v763
  %1125 = vmatprep.subr.bf16.mxu0 0
  %1126 = vmatpush1.bf16.msra.mxu0 %v764
  %1127 = vmatprep.subr.bf16.mxu0 0
  %1128 = vmatpush1.bf16.msra.mxu0 %v765
  %1129 = vmatprep.subr.bf16.mxu0 0
  %1130 = vmatpush1.bf16.msra.mxu0 0
  %1131 = vmatprep.subr.bf16.mxu0 0
  %1132 = vmatpush1.bf16.msra.mxu0 0
  %1133 = vmatprep.subr.bf16.mxu0 0
  %1134 = vmatpush1.bf16.msra.mxu0 0
  %1135 = vmatprep.subr.bf16.mxu0 0
  %1136 = vmatpush1.bf16.msra.mxu0 0
  %1137 = vmatprep.subr.bf16.mxu0 0
  %1138 = vmatpush1.bf16.msra.mxu0 0
  %1139 = vmatprep.subr.bf16.mxu0 0
  %1140 = vmatpush1.bf16.msra.mxu0 0
  %1141 = vmatprep.subr.bf16.mxu0 0
  %1142 = vmatpush1.bf16.msra.mxu0 0
  %1143 = vmatprep.subr.bf16.mxu0 0
  %1144 = vmatpush1.bf16.msra.mxu0 0
  %1145 = vmatprep.mubr.bf16.mxu0 0
  %1146 = vmatmul.mubr.bf16.gmra.mrb[0].mxu0 %v380
  %v1147 = vpop.f32.mrb[0].mxu0
  %v1148 = vadd.f32 %v1051, %v1147
  %v1149 = vpop.f32.mrb[0].mxu0
  %v1150 = vpop.f32.mrb[0].mxu0
  %v1151 = vadd.f32 %v1054, %v1150
  %v1152 = vpop.f32.mrb[0].mxu0
  %1153 = vmatprep.mubr.bf16.mxu0 0
  %1154 = vmatmul.mubr.bf16.gmra.mrb[0].mxu0 %v387
  %v1155 = vpop.f32.mrb[0].mxu0
  %v1156 = vadd.f32 %v1059, %v1155
  %v1157 = vpop.f32.mrb[0].mxu0
  %v1158 = vpop.f32.mrb[0].mxu0
  %v1159 = vadd.f32 %v1062, %v1158
  %v1160 = vpop.f32.mrb[0].mxu0
  %1161 = vmatprep.mubr.bf16.mxu0 0
  %1162 = vmatmul.mubr.bf16.gmra.mrb[0].mxu0 %v394
  %v1163 = vpop.f32.mrb[0].mxu0
  %v1164 = vadd.f32 %v1067, %v1163
  %v1165 = vpop.f32.mrb[0].mxu0
  %v1166 = vpop.f32.mrb[0].mxu0
  %v1167 = vadd.f32 %v1070, %v1166
  %v1168 = vpop.f32.mrb[0].mxu0
  %1169 = vmatprep.mubr.bf16.mxu0 0
  %1170 = vmatmul.mubr.bf16.gmra.mrb[0].mxu0 %v401
  %v1171 = vpop.f32.mrb[0].mxu0
  %v1172 = vadd.f32 %v1075, %v1171
  %v1173 = vpop.f32.mrb[0].mxu0
  %v1174 = vpop.f32.mrb[0].mxu0
  %v1175 = vadd.f32 %v1078, %v1174
  %v1176 = vpop.f32.mrb[0].mxu0
  %1177 = vmatprep.mubr.bf16.mxu0 0
  %1178 = vmatmul.mubr.bf16.gmra.mrb[0].mxu0 %v408
  %v1179 = vpop.f32.mrb[0].mxu0
  %v1180 = vadd.f32 %v1083, %v1179
  %v1181 = vpop.f32.mrb[0].mxu0
  %v1182 = vpop.f32.mrb[0].mxu0
  %v1183 = vadd.f32 %v1086, %v1182
  %v1184 = vpop.f32.mrb[0].mxu0
  %1185 = vmatprep.mubr.bf16.mxu0 0
  %1186 = vmatmul.mubr.bf16.gmra.mrb[0].mxu0 %v415
  %v1187 = vpop.f32.mrb[0].mxu0
  %v1188 = vadd.f32 %v1091, %v1187
  %v1189 = vpop.f32.mrb[0].mxu0
  %v1190 = vpop.f32.mrb[0].mxu0
  %v1191 = vadd.f32 %v1094, %v1190
  %v1192 = vpop.f32.mrb[0].mxu0
  %1193 = vmatprep.mubr.bf16.mxu0 0
  %1194 = vmatmul.mubr.bf16.gmra.mrb[0].mxu0 %v422
  %v1195 = vpop.f32.mrb[0].mxu0
  %v1196 = vadd.f32 %v1099, %v1195
  %v1197 = vpop.f32.mrb[0].mxu0
  %v1198 = vpop.f32.mrb[0].mxu0
  %v1199 = vadd.f32 %v1102, %v1198
  %v1200 = vpop.f32.mrb[0].mxu0
  %1201 = vmatprep.mubr.bf16.mxu0 0
  %1202 = vmatmul.mubr.bf16.gmra.mrb[0].mxu0 %v429
  %v1203 = vpop.f32.mrb[0].mxu0
  %v1204 = vadd.f32 %v1107, %v1203
  %v1205 = vpop.f32.mrb[0].mxu0
  %v1206 = vpop.f32.mrb[0].mxu0
  %v1207 = vadd.f32 %v1110, %v1206
  %v1208 = vpop.f32.mrb[0].mxu0
  %1209 = vdwg.mxu0
  %v1210 = vmax.f32 %v1148, 0.0
  %v1211 = vmax.f32 %v1151, 0.0
  %v1212 = vmax.f32 %v1156, 0.0
  %v1213 = vmax.f32 %v1159, 0.0
  %v1214 = vmax.f32 %v1164, 0.0
  %v1215 = vmax.f32 %v1167, 0.0
  %v1216 = vmax.f32 %v1172, 0.0
  %v1217 = vmax.f32 %v1175, 0.0
  %v1218 = vmax.f32 %v1180, 0.0
  %v1219 = vmax.f32 %v1183, 0.0
  %v1220 = vmax.f32 %v1188, 0.0
  %v1221 = vmax.f32 %v1191, 0.0
  %v1222 = vmax.f32 %v1196, 0.0
  %v1223 = vmax.f32 %v1199, 0.0
  %v1224 = vmax.f32 %v1204, 0.0
  %v1225 = vmax.f32 %v1207, 0.0
  %v1226 = vpack.c.bf16 %v1211, %v1210
  %v1227 = vpack.c.bf16 %v1213, %v1212
  %v1228 = vpack.c.bf16 %v1215, %v1214
  %v1229 = vpack.c.bf16 %v1217, %v1216
  %v1230 = vpack.c.bf16 %v1219, %v1218
  %v1231 = vpack.c.bf16 %v1221, %v1220
  %v1232 = vpack.c.bf16 %v1223, %v1222
  %v1233 = vpack.c.bf16 %v1225, %v1224
  %v1242 = vunpack.c.l.b16 %v1226
  %v1243 = vunpack.c.h.b16 %v1226
  %v1244 = vunpack.c.l.b16 %v1227
  %v1245 = vunpack.c.h.b16 %v1227
  %v1246 = vunpack.c.l.b16 %v1228
  %v1247 = vunpack.c.h.b16 %v1228
  %v1248 = vunpack.c.l.b16 %v1229
  %v1249 = vunpack.c.h.b16 %v1229
  %v1250 = vunpack.c.l.b16 %v1230
  %v1251 = vunpack.c.h.b16 %v1230
  %v1252 = vunpack.c.l.b16 %v1231
  %v1253 = vunpack.c.h.b16 %v1231
  %v1254 = vunpack.c.l.b16 %v1232
  %v1255 = vunpack.c.h.b16 %v1232
  %v1256 = vunpack.c.l.b16 %v1233
  %v1257 = vunpack.c.h.b16 %v1233
  %v1258 = vpack.c.b16 %v1242, %v1242
  %v1259 = vpack.c.b16 %v1243, %v1243
  %v1260 = vpack.c.b16 %v1244, %v1244
  %v1261 = vpack.c.b16 %v1245, %v1245
  %v1262 = vpack.c.b16 %v1246, %v1246
  %v1263 = vpack.c.b16 %v1247, %v1247
  %v1264 = vpack.c.b16 %v1248, %v1248
  %v1265 = vpack.c.b16 %v1249, %v1249
  %v1266 = vpack.c.b16 %v1250, %v1250
  %v1267 = vpack.c.b16 %v1251, %v1251
  %v1268 = vpack.c.b16 %v1252, %v1252
  %v1269 = vpack.c.b16 %v1253, %v1253
  %v1270 = vpack.c.b16 %v1254, %v1254
  %v1271 = vpack.c.b16 %v1255, %v1255
  %v1272 = vpack.c.b16 %v1256, %v1256
  %v1273 = vpack.c.b16 %v1257, %v1257
  %1290 = vst [vmem:[%s3] sm:$0xf] %v1258
  %1291 = vst [vmem:[%s3 + $0x4] sm:$0xf] %v1259
  %1292 = vst [vmem:[%s3 + $0x8] sm:$0xf] %v1260
  %1293 = vst [vmem:[%s3 + $0xc] sm:$0xf] %v1261
  %1294 = vst [vmem:[%s3 + $0x10] sm:$0xf] %v1262
  %1295 = vst [vmem:[%s3 + $0x14] sm:$0xf] %v1263
  %1296 = vst [vmem:[%s3 + $0x18] sm:$0xf] %v1264
  %1297 = vst [vmem:[%s3 + $0x1c] sm:$0xf] %v1265
  %1298 = vst [vmem:[%s3 + $0x20] sm:$0xf] %v1266
  %1299 = vst [vmem:[%s3 + $0x24] sm:$0xf] %v1267
  %1300 = vst [vmem:[%s3 + $0x28] sm:$0xf] %v1268
  %1301 = vst [vmem:[%s3 + $0x2c] sm:$0xf] %v1269
  %1302 = vst [vmem:[%s3 + $0x30] sm:$0xf] %v1270
  %1303 = vst [vmem:[%s3 + $0x34] sm:$0xf] %v1271
  %1304 = vst [vmem:[%s3 + $0x38] sm:$0xf] %v1272
  %1305 = vst [vmem:[%s3 + $0x3c] sm:$0xf] %v1273
  // Predicated region
  $region14: #{net_forward.7} parent=0 // pred_check
    _
  $region15: #{net_forward.7} parent=0 // pred_check_branch
    %1307 = sbr.rel (0) target = $region17
  $region16: #{net_forward.7} parent=0 // pred_region
    _
  $region17: #{net_forward.7} parent=0 // pred_fallthru
    _
  // Predicated region
  $region18: #{net_forward.7} parent=0 // pred_check
    _
  $region19: #{net_forward.7} parent=0 // pred_check_branch
    %1309 = sbr.rel (0) target = $region21
  $region20: #{net_forward.7} parent=0 // pred_region
    _
  $region21: #{net_forward.7} parent=0 // pred_fallthru
    _

// kernel: net_forward.8
$region0: #{net_forward.8}
  #allocation0 [shape = 'u32[]', space=smem, size = 0x4, offset = 0x4, fixed_abs, tag = 'smem constant byte address 0x4 - core index']
  #allocation1 [shape = 'u32[144,128]{1,0:T(1,128)}', space=vmem, size = 0x12000, scoped, tag = 'internal scratch']
  %s0 = inlined_call_operand.vmem [shape: bf16[16,1792], index: 0, kind: input, shape index: {}]
  %s1 = inlined_call_operand.vmem [shape: bf16[1792,128], index: 1, kind: input, shape index: {}]
  %s2 = inlined_call_operand.vmem [shape: f32[1,128], index: 2, kind: input, shape index: {}]
  %s3 = inlined_call_operand.vmem [shape: bf16[16,128], index: 3, kind: output, shape index: {}]
  %s4 = sld [smem:[#allocation0]]
  $region22: #{net_forward.8} parent=0
    _
  %s6 = ssub.s32 1, %s4
  %s7 = scalar_select 0, %s6, %s4
  // Predicated region
  $region2: #{net_forward.8} parent=0 // pred_check
    _
  $region3: #{net_forward.8} parent=0 // pred_check_branch
    %9 = sbr.rel (0) target = $region5
  $region4: #{net_forward.8} parent=0 // pred_region
    _
  $region5: #{net_forward.8} parent=0 // pred_fallthru
    _
  // Predicated region
  $region6: #{net_forward.8} parent=0 // pred_check
    _
  $region7: #{net_forward.8} parent=0 // pred_check_branch
    %11 = sbr.rel (0) target = $region9
  $region8: #{net_forward.8} parent=0 // pred_region
    _
  $region9: #{net_forward.8} parent=0 // pred_fallthru
    _
  // Predicated region
  $region10: #{net_forward.8} parent=0 // pred_check
    _
  $region11: #{net_forward.8} parent=0 // pred_check_branch
    %13 = sbr.rel (0) target = $region13
  $region12: #{net_forward.8} parent=0 // pred_region
    _
  $region13: #{net_forward.8} parent=0 // pred_fallthru
    _
  %v15 = vld [vmem:[%s0] sm:$0xff]
  %v16 = vld [vmem:[%s0 + $0x8] sm:$0xff]
  %v17 = vld [vmem:[%s0 + $0x10] sm:$0xff]
  %v18 = vld [vmem:[%s0 + $0x18] sm:$0xff]
  %v19 = vld [vmem:[%s0 + $0x20] sm:$0xff]
  %v20 = vld [vmem:[%s0 + $0x28] sm:$0xff]
  %v21 = vld [vmem:[%s0 + $0x30] sm:$0xff]
  %v22 = vld [vmem:[%s0 + $0x38] sm:$0xff]
  %v23 = vld [vmem:[%s0 + $0x40] sm:$0xff]
  %v24 = vld [vmem:[%s0 + $0x48] sm:$0xff]
  %v25 = vld [vmem:[%s0 + $0x50] sm:$0xff]
  %v26 = vld [vmem:[%s0 + $0x58] sm:$0xff]
  %v27 = vld [vmem:[%s0 + $0x60] sm:$0xff]
  %v28 = vld [vmem:[%s0 + $0x68] sm:$0xff]
  %v29 = vld [vmem:[%s1] sm:$0xf]
  %v30 = vld [vmem:[%s1 + $0x4] sm:$0xf]
  %v31 = vld [vmem:[%s1 + $0x8] sm:$0xf]
  %v32 = vld [vmem:[%s1 + $0xc] sm:$0xf]
  %v33 = vld [vmem:[%s1 + $0x10] sm:$0xf]
  %v34 = vld [vmem:[%s1 + $0x14] sm:$0xf]
  %v35 = vld [vmem:[%s1 + $0x18] sm:$0xf]
  %v36 = vld [vmem:[%s1 + $0x1c] sm:$0xf]
  %v37 = vld [vmem:[%s1 + $0x20] sm:$0xf]
  %v38 = vld [vmem:[%s1 + $0x24] sm:$0xf]
  %v39 = vld [vmem:[%s1 + $0x28] sm:$0xf]
  %v40 = vld [vmem:[%s1 + $0x2c] sm:$0xf]
  %v41 = vld [vmem:[%s1 + $0x30] sm:$0xf]
  %v42 = vld [vmem:[%s1 + $0x34] sm:$0xf]
  %v43 = vld [vmem:[%s1 + $0x38] sm:$0xf]
  %v44 = vld [vmem:[%s1 + $0x3c] sm:$0xf]
  %v45 = vld [vmem:[%s1 + $0x40] sm:$0xf]
  %v46 = vld [vmem:[%s1 + $0x44] sm:$0xf]
  %v47 = vld [vmem:[%s1 + $0x48] sm:$0xf]
  %v48 = vld [vmem:[%s1 + $0x4c] sm:$0xf]
  %v49 = vld [vmem:[%s1 + $0x50] sm:$0xf]
  %v50 = vld [vmem:[%s1 + $0x54] sm:$0xf]
  %v51 = vld [vmem:[%s1 + $0x58] sm:$0xf]
  %v52 = vld [vmem:[%s1 + $0x5c] sm:$0xf]
  %v53 = vld [vmem:[%s1 + $0x60] sm:$0xf]
  %v54 = vld [vmem:[%s1 + $0x64] sm:$0xf]
  %v55 = vld [vmem:[%s1 + $0x68] sm:$0xf]
  %v56 = vld [vmem:[%s1 + $0x6c] sm:$0xf]
  %v57 = vld [vmem:[%s1 + $0x70] sm:$0xf]
  %v58 = vld [vmem:[%s1 + $0x74] sm:$0xf]
  %v59 = vld [vmem:[%s1 + $0x78] sm:$0xf]
  %v60 = vld [vmem:[%s1 + $0x7c] sm:$0xf]
  %v61 = vld [vmem:[%s1 + $0x80] sm:$0xf]
  %v62 = vld [vmem:[%s1 + $0x84] sm:$0xf]
  %v63 = vld [vmem:[%s1 + $0x88] sm:$0xf]
  %v64 = vld [vmem:[%s1 + $0x8c] sm:$0xf]
  %v65 = vld [vmem:[%s1 + $0x90] sm:$0xf]
  %v66 = vld [vmem:[%s1 + $0x94] sm:$0xf]
  %v67 = vld [vmem:[%s1 + $0x98] sm:$0xf]
  %v68 = vld [vmem:[%s1 + $0x9c] sm:$0xf]
  %v69 = vld [vmem:[%s1 + $0xa0] sm:$0xf]
  %v70 = vld [vmem:[%s1 + $0xa4] sm:$0xf]
  %v71 = vld [vmem:[%s1 + $0xa8] sm:$0xf]
  %v72 = vld [vmem:[%s1 + $0xac] sm:$0xf]
  %v73 = vld [vmem:[%s1 + $0xb0] sm:$0xf]
  %v74 = vld [vmem:[%s1 + $0xb4] sm:$0xf]
  %v75 = vld [vmem:[%s1 + $0xb8] sm:$0xf]
  %v76 = vld [vmem:[%s1 + $0xbc] sm:$0xf]
  %v77 = vld [vmem:[%s1 + $0xc0] sm:$0xf]
  %v78 = vld [vmem:[%s1 + $0xc4] sm:$0xf]
  %v79 = vld [vmem:[%s1 + $0xc8] sm:$0xf]
  %v80 = vld [vmem:[%s1 + $0xcc] sm:$0xf]
  %v81 = vld [vmem:[%s1 + $0xd0] sm:$0xf]
  %v82 = vld [vmem:[%s1 + $0xd4] sm:$0xf]
  %v83 = vld [vmem:[%s1 + $0xd8] sm:$0xf]
  %v84 = vld [vmem:[%s1 + $0xdc] sm:$0xf]
  %v85 = vld [vmem:[%s1 + $0xe0] sm:$0xf]
  %v86 = vld [vmem:[%s1 + $0xe4] sm:$0xf]
  %v87 = vld [vmem:[%s1 + $0xe8] sm:$0xf]
  %v88 = vld [vmem:[%s1 + $0xec] sm:$0xf]
  %v89 = vld [vmem:[%s1 + $0xf0] sm:$0xf]
  %v90 = vld [vmem:[%s1 + $0xf4] sm:$0xf]
  %v91 = vld [vmem:[%s1 + $0xf8] sm:$0xf]
  %v92 = vld [vmem:[%s1 + $0xfc] sm:$0xf]
  %v93 = vld [vmem:[%s1 + $0x100] sm:$0xf]
  %v94 = vld [vmem:[%s1 + $0x104] sm:$0xf]
  %v95 = vld [vmem:[%s1 + $0x108] sm:$0xf]
  %v96 = vld [vmem:[%s1 + $0x10c] sm:$0xf]
  %v97 = vld [vmem:[%s1 + $0x110] sm:$0xf]
  %v98 = vld [vmem:[%s1 + $0x114] sm:$0xf]
  %v99 = vld [vmem:[%s1 + $0x118] sm:$0xf]
  %v100 = vld [vmem:[%s1 + $0x11c] sm:$0xf]
  %v101 = vld [vmem:[%s1 + $0x120] sm:$0xf]
  %v102 = vld [vmem:[%s1 + $0x124] sm:$0xf]
  %v103 = vld [vmem:[%s1 + $0x128] sm:$0xf]
  %v104 = vld [vmem:[%s1 + $0x12c] sm:$0xf]
  %v105 = vld [vmem:[%s1 + $0x130] sm:$0xf]
  %v106 = vld [vmem:[%s1 + $0x134] sm:$0xf]
  %v107 = vld [vmem:[%s1 + $0x138] sm:$0xf]
  %v108 = vld [vmem:[%s1 + $0x13c] sm:$0xf]
  %v109 = vld [vmem:[%s1 + $0x140] sm:$0xf]
  %v110 = vld [vmem:[%s1 + $0x144] sm:$0xf]
  %v111 = vld [vmem:[%s1 + $0x148] sm:$0xf]
  %v112 = vld [vmem:[%s1 + $0x14c] sm:$0xf]
  %v113 = vld [vmem:[%s1 + $0x150] sm:$0xf]
  %v114 = vld [vmem:[%s1 + $0x154] sm:$0xf]
  %v115 = vld [vmem:[%s1 + $0x158] sm:$0xf]
  %v116 = vld [vmem:[%s1 + $0x15c] sm:$0xf]
  %v117 = vld [vmem:[%s1 + $0x160] sm:$0xf]
  %v118 = vld [vmem:[%s1 + $0x164] sm:$0xf]
  %v119 = vld [vmem:[%s1 + $0x168] sm:$0xf]
  %v120 = vld [vmem:[%s1 + $0x16c] sm:$0xf]
  %v121 = vld [vmem:[%s1 + $0x170] sm:$0xf]
  %v122 = vld [vmem:[%s1 + $0x174] sm:$0xf]
  %v123 = vld [vmem:[%s1 + $0x178] sm:$0xf]
  %v124 = vld [vmem:[%s1 + $0x17c] sm:$0xf]
  %v125 = vld [vmem:[%s1 + $0x180] sm:$0xf]
  %v126 = vld [vmem:[%s1 + $0x184] sm:$0xf]
  %v127 = vld [vmem:[%s1 + $0x188] sm:$0xf]
  %v128 = vld [vmem:[%s1 + $0x18c] sm:$0xf]
  %v129 = vld [vmem:[%s1 + $0x190] sm:$0xf]
  %v130 = vld [vmem:[%s1 + $0x194] sm:$0xf]
  %v131 = vld [vmem:[%s1 + $0x198] sm:$0xf]
  %v132 = vld [vmem:[%s1 + $0x19c] sm:$0xf]
  %v133 = vld [vmem:[%s1 + $0x1a0] sm:$0xf]
  %v134 = vld [vmem:[%s1 + $0x1a4] sm:$0xf]
  %v135 = vld [vmem:[%s1 + $0x1a8] sm:$0xf]
  %v136 = vld [vmem:[%s1 + $0x1ac] sm:$0xf]
  %v137 = vld [vmem:[%s1 + $0x1b0] sm:$0xf]
  %v138 = vld [vmem:[%s1 + $0x1b4] sm:$0xf]
  %v139 = vld [vmem:[%s1 + $0x1b8] sm:$0xf]
  %v140 = vld [vmem:[%s1 + $0x1bc] sm:$0xf]
  %v141 = vld [vmem:[%s1 + $0x1c0] sm:$0xf]
  %v142 = vld [vmem:[%s1 + $0x1c4] sm:$0xf]
  %v143 = vld [vmem:[%s1 + $0x1c8] sm:$0xf]
  %v144 = vld [vmem:[%s1 + $0x1cc] sm:$0xf]
  %v145 = vld [vmem:[%s1 + $0x1d0] sm:$0xf]
  %v146 = vld [vmem:[%s1 + $0x1d4] sm:$0xf]
  %v147 = vld [vmem:[%s1 + $0x1d8] sm:$0xf]
  %v148 = vld [vmem:[%s1 + $0x1dc] sm:$0xf]
  %v149 = vld [vmem:[%s1 + $0x1e0] sm:$0xf]
  %v150 = vld [vmem:[%s1 + $0x1e4] sm:$0xf]
  %v151 = vld [vmem:[%s1 + $0x1e8] sm:$0xf]
  %v152 = vld [vmem:[%s1 + $0x1ec] sm:$0xf]
  %v153 = vld [vmem:[%s1 + $0x1f0] sm:$0xf]
  %v154 = vld [vmem:[%s1 + $0x1f4] sm:$0xf]
  %v155 = vld [vmem:[%s1 + $0x1f8] sm:$0xf]
  %v156 = vld [vmem:[%s1 + $0x1fc] sm:$0xf]
  %v157 = vld [vmem:[%s1 + $0x200] sm:$0xf]
  %v158 = vld [vmem:[%s1 + $0x204] sm:$0xf]
  %v159 = vld [vmem:[%s1 + $0x208] sm:$0xf]
  %v160 = vld [vmem:[%s1 + $0x20c] sm:$0xf]
  %v161 = vld [vmem:[%s1 + $0x210] sm:$0xf]
  %v162 = vld [vmem:[%s1 + $0x214] sm:$0xf]
  %v163 = vld [vmem:[%s1 + $0x218] sm:$0xf]
  %v164 = vld [vmem:[%s1 + $0x21c] sm:$0xf]
  %v165 = vld [vmem:[%s1 + $0x220] sm:$0xf]
  %v166 = vld [vmem:[%s1 + $0x224] sm:$0xf]
  %v167 = vld [vmem:[%s1 + $0x228] sm:$0xf]
  %v168 = vld [vmem:[%s1 + $0x22c] sm:$0xf]
  %v169 = vld [vmem:[%s1 + $0x230] sm:$0xf]
  %v170 = vld [vmem:[%s1 + $0x234] sm:$0xf]
  %v171 = vld [vmem:[%s1 + $0x238] sm:$0xf]
  %v172 = vld [vmem:[%s1 + $0x23c] sm:$0xf]
  %v173 = vld [vmem:[%s1 + $0x240] sm:$0xf]
  %v174 = vld [vmem:[%s1 + $0x244] sm:$0xf]
  %v175 = vld [vmem:[%s1 + $0x248] sm:$0xf]
  %v176 = vld [vmem:[%s1 + $0x24c] sm:$0xf]
  %v177 = vld [vmem:[%s1 + $0x250] sm:$0xf]
  %v178 = vld [vmem:[%s1 + $0x254] sm:$0xf]
  %v179 = vld [vmem:[%s1 + $0x258] sm:$0xf]
  %v180 = vld [vmem:[%s1 + $0x25c] sm:$0xf]
  %v181 = vld [vmem:[%s1 + $0x260] sm:$0xf]
  %v182 = vld [vmem:[%s1 + $0x264] sm:$0xf]
  %v183 = vld [vmem:[%s1 + $0x268] sm:$0xf]
  %v184 = vld [vmem:[%s1 + $0x26c] sm:$0xf]
  %v185 = vld [vmem:[%s1 + $0x270] sm:$0xf]
  %v186 = vld [vmem:[%s1 + $0x274] sm:$0xf]
  %v187 = vld [vmem:[%s1 + $0x278] sm:$0xf]
  %v188 = vld [vmem:[%s1 + $0x27c] sm:$0xf]
  %v189 = vld [vmem:[%s1 + $0x280] sm:$0xf]
  %v190 = vld [vmem:[%s1 + $0x284] sm:$0xf]
  %v191 = vld [vmem:[%s1 + $0x288] sm:$0xf]
  %v192 = vld [vmem:[%s1 + $0x28c] sm:$0xf]
  %v193 = vld [vmem:[%s1 + $0x290] sm:$0xf]
  %v194 = vld [vmem:[%s1 + $0x294] sm:$0xf]
  %v195 = vld [vmem:[%s1 + $0x298] sm:$0xf]
  %v196 = vld [vmem:[%s1 + $0x29c] sm:$0xf]
  %v197 = vld [vmem:[%s1 + $0x2a0] sm:$0xf]
  %v198 = vld [vmem:[%s1 + $0x2a4] sm:$0xf]
  %v199 = vld [vmem:[%s1 + $0x2a8] sm:$0xf]
  %v200 = vld [vmem:[%s1 + $0x2ac] sm:$0xf]
  %v201 = vld [vmem:[%s1 + $0x2b0] sm:$0xf]
  %v202 = vld [vmem:[%s1 + $0x2b4] sm:$0xf]
  %v203 = vld [vmem:[%s1 + $0x2b8] sm:$0xf]
  %v204 = vld [vmem:[%s1 + $0x2bc] sm:$0xf]
  %v205 = vld [vmem:[%s1 + $0x2c0] sm:$0xf]
  %v206 = vld [vmem:[%s1 + $0x2c4] sm:$0xf]
  %v207 = vld [vmem:[%s1 + $0x2c8] sm:$0xf]
  %v208 = vld [vmem:[%s1 + $0x2cc] sm:$0xf]
  %v209 = vld [vmem:[%s1 + $0x2d0] sm:$0xf]
  %v210 = vld [vmem:[%s1 + $0x2d4] sm:$0xf]
  %v211 = vld [vmem:[%s1 + $0x2d8] sm:$0xf]
  %v212 = vld [vmem:[%s1 + $0x2dc] sm:$0xf]
  %v213 = vld [vmem:[%s1 + $0x2e0] sm:$0xf]
  %v214 = vld [vmem:[%s1 + $0x2e4] sm:$0xf]
  %v215 = vld [vmem:[%s1 + $0x2e8] sm:$0xf]
  %v216 = vld [vmem:[%s1 + $0x2ec] sm:$0xf]
  %v217 = vld [vmem:[%s1 + $0x2f0] sm:$0xf]
  %v218 = vld [vmem:[%s1 + $0x2f4] sm:$0xf]
  %v219 = vld [vmem:[%s1 + $0x2f8] sm:$0xf]
  %v220 = vld [vmem:[%s1 + $0x2fc] sm:$0xf]
  %v221 = vld [vmem:[%s1 + $0x300] sm:$0xf]
  %v222 = vld [vmem:[%s1 + $0x304] sm:$0xf]
  %v223 = vld [vmem:[%s1 + $0x308] sm:$0xf]
  %v224 = vld [vmem:[%s1 + $0x30c] sm:$0xf]
  %v225 = vld [vmem:[%s1 + $0x310] sm:$0xf]
  %v226 = vld [vmem:[%s1 + $0x314] sm:$0xf]
  %v227 = vld [vmem:[%s1 + $0x318] sm:$0xf]
  %v228 = vld [vmem:[%s1 + $0x31c] sm:$0xf]
  %v229 = vld [vmem:[%s1 + $0x320] sm:$0xf]
  %v230 = vld [vmem:[%s1 + $0x324] sm:$0xf]
  %v231 = vld [vmem:[%s1 + $0x328] sm:$0xf]
  %v232 = vld [vmem:[%s1 + $0x32c] sm:$0xf]
  %v233 = vld [vmem:[%s1 + $0x330] sm:$0xf]
  %v234 = vld [vmem:[%s1 + $0x334] sm:$0xf]
  %v235 = vld [vmem:[%s1 + $0x338] sm:$0xf]
  %v236 = vld [vmem:[%s1 + $0x33c] sm:$0xf]
  %v237 = vld [vmem:[%s1 + $0x340] sm:$0xf]
  %v238 = vld [vmem:[%s1 + $0x344] sm:$0xf]
  %v239 = vld [vmem:[%s1 + $0x348] sm:$0xf]
  %v240 = vld [vmem:[%s1 + $0x34c] sm:$0xf]
  %v241 = vld [vmem:[%s1 + $0x350] sm:$0xf]
  %v242 = vld [vmem:[%s1 + $0x354] sm:$0xf]
  %v243 = vld [vmem:[%s1 + $0x358] sm:$0xf]
  %v244 = vld [vmem:[%s1 + $0x35c] sm:$0xf]
  %v245 = vld [vmem:[%s1 + $0x360] sm:$0xf]
  %v246 = vld [vmem:[%s1 + $0x364] sm:$0xf]
  %v247 = vld [vmem:[%s1 + $0x368] sm:$0xf]
  %v248 = vld [vmem:[%s1 + $0x36c] sm:$0xf]
  %v249 = vld [vmem:[%s1 + $0x370] sm:$0xf]
  %v250 = vld [vmem:[%s1 + $0x374] sm:$0xf]
  %v251 = vld [vmem:[%s1 + $0x378] sm:$0xf]
  %v252 = vld [vmem:[%s1 + $0x37c] sm:$0xf]
  %v253 = vld [vmem:[%s2] sm:$0x1]
  %v255 = vlaneseq
  %v256 = vshrl.u32 %v255, 7
  %v257 = vsub.s32 0, %v256
  %v258 = vrot.slane %v253, %v257
  %v274 = vunpack.c.l.b16 %v15
  %v275 = vunpack.c.h.b16 %v15
  %v276 = vunpack.c.l.b16 %v16
  %v277 = vunpack.c.h.b16 %v16
  %v278 = vunpack.c.l.b16 %v17
  %v279 = vunpack.c.h.b16 %v17
  %v280 = vunpack.c.l.b16 %v18
  %v281 = vunpack.c.h.b16 %v18
  %v282 = vunpack.c.l.b16 %v19
  %v283 = vunpack.c.h.b16 %v19
  %v284 = vunpack.c.l.b16 %v20
  %v285 = vunpack.c.h.b16 %v20
  %v286 = vunpack.c.l.b16 %v21
  %v287 = vunpack.c.h.b16 %v21
  %v288 = vunpack.c.l.b16 %v22
  %v289 = vunpack.c.h.b16 %v22
  %v290 = vunpack.c.l.b16 %v23
  %v291 = vunpack.c.h.b16 %v23
  %v292 = vunpack.c.l.b16 %v24
  %v293 = vunpack.c.h.b16 %v24
  %v294 = vunpack.c.l.b16 %v25
  %v295 = vunpack.c.h.b16 %v25
  %v296 = vunpack.c.l.b16 %v26
  %v297 = vunpack.c.h.b16 %v26
  %v298 = vunpack.c.l.b16 %v27
  %v299 = vunpack.c.h.b16 %v27
  %v300 = vunpack.c.l.b16 %v28
  %v301 = vunpack.c.h.b16 %v28
  %v302 = vpack.c.b16 %v288, %v274
  %v303 = vpack.c.b16 %v289, %v275
  %v304 = vpack.c.b16 %v290, %v276
  %v305 = vpack.c.b16 %v291, %v277
  %v306 = vpack.c.b16 %v292, %v278
  %v307 = vpack.c.b16 %v293, %v279
  %v308 = vpack.c.b16 %v294, %v280
  %v309 = vpack.c.b16 %v295, %v281
  %v310 = vpack.c.b16 %v296, %v282
  %v311 = vpack.c.b16 %v297, %v283
  %v312 = vpack.c.b16 %v298, %v284
  %v313 = vpack.c.b16 %v299, %v285
  %v314 = vpack.c.b16 %v300, %v286
  %v315 = vpack.c.b16 %v301, %v287
  %v554 = vunpack.c.l.b16 %v29
  %v555 = vunpack.c.l.b16 %v30
  %v556 = vunpack.c.l.b16 %v31
  %v557 = vunpack.c.l.b16 %v32
  %v558 = vunpack.c.l.b16 %v33
  %v559 = vunpack.c.l.b16 %v34
  %v560 = vunpack.c.l.b16 %v35
  %v561 = vunpack.c.l.b16 %v36
  %v562 = vunpack.c.l.b16 %v37
  %v563 = vunpack.c.l.b16 %v38
  %v564 = vunpack.c.l.b16 %v39
  %v565 = vunpack.c.l.b16 %v40
  %v566 = vunpack.c.l.b16 %v41
  %v567 = vunpack.c.l.b16 %v42
  %v568 = vunpack.c.l.b16 %v43
  %v569 = vunpack.c.l.b16 %v44
  %v570 = vunpack.c.l.b16 %v45
  %v571 = vunpack.c.l.b16 %v46
  %v572 = vunpack.c.l.b16 %v47
  %v573 = vunpack.c.l.b16 %v48
  %v574 = vunpack.c.l.b16 %v49
  %v575 = vunpack.c.l.b16 %v50
  %v576 = vunpack.c.l.b16 %v51
  %v577 = vunpack.c.l.b16 %v52
  %v578 = vunpack.c.l.b16 %v53
  %v579 = vunpack.c.l.b16 %v54
  %v580 = vunpack.c.l.b16 %v55
  %v581 = vunpack.c.l.b16 %v56
  %v582 = vunpack.c.l.b16 %v57
  %v583 = vunpack.c.l.b16 %v58
  %v584 = vunpack.c.l.b16 %v59
  %v585 = vunpack.c.l.b16 %v60
  %v586 = vunpack.c.l.b16 %v61
  %v587 = vunpack.c.l.b16 %v62
  %v588 = vunpack.c.l.b16 %v63
  %v589 = vunpack.c.l.b16 %v64
  %v590 = vunpack.c.l.b16 %v65
  %v591 = vunpack.c.l.b16 %v66
  %v592 = vunpack.c.l.b16 %v67
  %v593 = vunpack.c.l.b16 %v68
  %v594 = vunpack.c.l.b16 %v69
  %v595 = vunpack.c.l.b16 %v70
  %v596 = vunpack.c.l.b16 %v71
  %v597 = vunpack.c.l.b16 %v72
  %v598 = vunpack.c.l.b16 %v73
  %v599 = vunpack.c.l.b16 %v74
  %v600 = vunpack.c.l.b16 %v75
  %v601 = vunpack.c.l.b16 %v76
  %v602 = vunpack.c.l.b16 %v77
  %v603 = vunpack.c.l.b16 %v78
  %v604 = vunpack.c.l.b16 %v79
  %v605 = vunpack.c.l.b16 %v80
  %v606 = vunpack.c.l.b16 %v81
  %v607 = vunpack.c.l.b16 %v82
  %v608 = vunpack.c.l.b16 %v83
  %v609 = vunpack.c.l.b16 %v84
  %v610 = vunpack.c.l.b16 %v85
  %v611 = vunpack.c.l.b16 %v86
  %v612 = vunpack.c.l.b16 %v87
  %v613 = vunpack.c.l.b16 %v88
  %v614 = vunpack.c.l.b16 %v89
  %v615 = vunpack.c.l.b16 %v90
  %v616 = vunpack.c.l.b16 %v91
  %v617 = vunpack.c.l.b16 %v92
  %v618 = vunpack.c.l.b16 %v93
  %v619 = vunpack.c.l.b16 %v94
  %v620 = vunpack.c.l.b16 %v95
  %v621 = vunpack.c.l.b16 %v96
  %v622 = vunpack.c.l.b16 %v97
  %v623 = vunpack.c.l.b16 %v98
  %v624 = vunpack.c.l.b16 %v99
  %v625 = vunpack.c.l.b16 %v100
  %v626 = vunpack.c.l.b16 %v101
  %v627 = vunpack.c.l.b16 %v102
  %v628 = vunpack.c.l.b16 %v103
  %v629 = vunpack.c.l.b16 %v104
  %v630 = vunpack.c.l.b16 %v105
  %v631 = vunpack.c.l.b16 %v106
  %v632 = vunpack.c.l.b16 %v107
  %v633 = vunpack.c.l.b16 %v108
  %v634 = vunpack.c.l.b16 %v109
  %v635 = vunpack.c.l.b16 %v110
  %v636 = vunpack.c.l.b16 %v111
  %v637 = vunpack.c.l.b16 %v112
  %v638 = vunpack.c.l.b16 %v113
  %v639 = vunpack.c.l.b16 %v114
  %v640 = vunpack.c.l.b16 %v115
  %v641 = vunpack.c.l.b16 %v116
  %v642 = vunpack.c.l.b16 %v117
  %v643 = vunpack.c.l.b16 %v118
  %v644 = vunpack.c.l.b16 %v119
  %v645 = vunpack.c.l.b16 %v120
  %v646 = vunpack.c.l.b16 %v121
  %v647 = vunpack.c.l.b16 %v122
  %v648 = vunpack.c.l.b16 %v123
  %v649 = vunpack.c.l.b16 %v124
  %v650 = vunpack.c.l.b16 %v125
  %v651 = vunpack.c.l.b16 %v126
  %v652 = vunpack.c.l.b16 %v127
  %v653 = vunpack.c.l.b16 %v128
  %v654 = vunpack.c.l.b16 %v129
  %v655 = vunpack.c.l.b16 %v130
  %v656 = vunpack.c.l.b16 %v131
  %v657 = vunpack.c.l.b16 %v132
  %v658 = vunpack.c.l.b16 %v133
  %v659 = vunpack.c.l.b16 %v134
  %v660 = vunpack.c.l.b16 %v135
  %v661 = vunpack.c.l.b16 %v136
  %v662 = vunpack.c.l.b16 %v137
  %v663 = vunpack.c.l.b16 %v138
  %v664 = vunpack.c.l.b16 %v139
  %v665 = vunpack.c.l.b16 %v140
  %v666 = vunpack.c.l.b16 %v141
  %v667 = vunpack.c.l.b16 %v142
  %v668 = vunpack.c.l.b16 %v143
  %v669 = vunpack.c.l.b16 %v144
  %v670 = vunpack.c.l.b16 %v145
  %v671 = vunpack.c.l.b16 %v146
  %v672 = vunpack.c.l.b16 %v147
  %v673 = vunpack.c.l.b16 %v148
  %v674 = vunpack.c.l.b16 %v149
  %v675 = vunpack.c.l.b16 %v150
  %v676 = vunpack.c.l.b16 %v151
  %v677 = vunpack.c.l.b16 %v152
  %v678 = vunpack.c.l.b16 %v153
  %v679 = vunpack.c.l.b16 %v154
  %v680 = vunpack.c.l.b16 %v155
  %v681 = vunpack.c.l.b16 %v156
  %v682 = vunpack.c.l.b16 %v157
  %v683 = vunpack.c.l.b16 %v158
  %v684 = vunpack.c.l.b16 %v159
  %v685 = vunpack.c.l.b16 %v160
  %v686 = vunpack.c.l.b16 %v161
  %v687 = vunpack.c.l.b16 %v162
  %v688 = vunpack.c.l.b16 %v163
  %v689 = vunpack.c.l.b16 %v164
  %v690 = vunpack.c.l.b16 %v165
  %v691 = vunpack.c.l.b16 %v166
  %v692 = vunpack.c.l.b16 %v167
  %v693 = vunpack.c.l.b16 %v168
  %v694 = vunpack.c.l.b16 %v169
  %v695 = vunpack.c.l.b16 %v170
  %v696 = vunpack.c.l.b16 %v171
  %v697 = vunpack.c.l.b16 %v172
  %v698 = vunpack.c.l.b16 %v173
  %v699 = vunpack.c.l.b16 %v174
  %v700 = vunpack.c.l.b16 %v175
  %v701 = vunpack.c.l.b16 %v176
  %v702 = vunpack.c.l.b16 %v177
  %v703 = vunpack.c.l.b16 %v178
  %v704 = vunpack.c.l.b16 %v179
  %v705 = vunpack.c.l.b16 %v180
  %v706 = vunpack.c.l.b16 %v181
  %v707 = vunpack.c.l.b16 %v182
  %v708 = vunpack.c.l.b16 %v183
  %v709 = vunpack.c.l.b16 %v184
  %v710 = vunpack.c.l.b16 %v185
  %v711 = vunpack.c.l.b16 %v186
  %v712 = vunpack.c.l.b16 %v187
  %v713 = vunpack.c.l.b16 %v188
  %v714 = vunpack.c.l.b16 %v189
  %v715 = vunpack.c.l.b16 %v190
  %v716 = vunpack.c.l.b16 %v191
  %v717 = vunpack.c.l.b16 %v192
  %v718 = vunpack.c.l.b16 %v193
  %v719 = vunpack.c.l.b16 %v194
  %v720 = vunpack.c.l.b16 %v195
  %v721 = vunpack.c.l.b16 %v196
  %v722 = vunpack.c.l.b16 %v197
  %v723 = vunpack.c.l.b16 %v198
  %v724 = vunpack.c.l.b16 %v199
  %v725 = vunpack.c.l.b16 %v200
  %v726 = vunpack.c.l.b16 %v201
  %v727 = vunpack.c.l.b16 %v202
  %v728 = vunpack.c.l.b16 %v203
  %v729 = vunpack.c.l.b16 %v204
  %v730 = vunpack.c.l.b16 %v205
  %v731 = vunpack.c.l.b16 %v206
  %v732 = vunpack.c.l.b16 %v207
  %v733 = vunpack.c.l.b16 %v208
  %v734 = vunpack.c.l.b16 %v209
  %v735 = vunpack.c.l.b16 %v210
  %v736 = vunpack.c.l.b16 %v211
  %v737 = vunpack.c.l.b16 %v212
  %v738 = vunpack.c.l.b16 %v213
  %v739 = vunpack.c.l.b16 %v214
  %v740 = vunpack.c.l.b16 %v215
  %v741 = vunpack.c.l.b16 %v216
  %v742 = vunpack.c.l.b16 %v217
  %v743 = vunpack.c.l.b16 %v218
  %v744 = vunpack.c.l.b16 %v219
  %v745 = vunpack.c.l.b16 %v220
  %v746 = vunpack.c.l.b16 %v221
  %v747 = vunpack.c.l.b16 %v222
  %v748 = vunpack.c.l.b16 %v223
  %v749 = vunpack.c.l.b16 %v224
  %v750 = vunpack.c.l.b16 %v225
  %v751 = vunpack.c.l.b16 %v226
  %v752 = vunpack.c.l.b16 %v227
  %v753 = vunpack.c.l.b16 %v228
  %v754 = vunpack.c.l.b16 %v229
  %v755 = vunpack.c.l.b16 %v230
  %v756 = vunpack.c.l.b16 %v231
  %v757 = vunpack.c.l.b16 %v232
  %v758 = vunpack.c.l.b16 %v233
  %v759 = vunpack.c.l.b16 %v234
  %v760 = vunpack.c.l.b16 %v235
  %v761 = vunpack.c.l.b16 %v236
  %v762 = vunpack.c.l.b16 %v237
  %v763 = vunpack.c.l.b16 %v238
  %v764 = vunpack.c.l.b16 %v239
  %v765 = vunpack.c.l.b16 %v240
  %v766 = vunpack.c.l.b16 %v241
  %v767 = vunpack.c.l.b16 %v242
  %v768 = vunpack.c.l.b16 %v243
  %v769 = vunpack.c.l.b16 %v244
  %v770 = vunpack.c.l.b16 %v245
  %v771 = vunpack.c.l.b16 %v246
  %v772 = vunpack.c.l.b16 %v247
  %v773 = vunpack.c.l.b16 %v248
  %v774 = vunpack.c.l.b16 %v249
  %v775 = vunpack.c.l.b16 %v250
  %v776 = vunpack.c.l.b16 %v251
  %v777 = vunpack.c.l.b16 %v252
  %v778 = vpack.c.b16 %v555, %v554
  %v779 = vpack.c.b16 %v557, %v556
  %v780 = vpack.c.b16 %v559, %v558
  %v781 = vpack.c.b16 %v561, %v560
  %v782 = vpack.c.b16 %v563, %v562
  %v783 = vpack.c.b16 %v565, %v564
  %v784 = vpack.c.b16 %v567, %v566
  %v785 = vpack.c.b16 %v569, %v568
  %v786 = vpack.c.b16 %v571, %v570
  %v787 = vpack.c.b16 %v573, %v572
  %v788 = vpack.c.b16 %v575, %v574
  %v789 = vpack.c.b16 %v577, %v576
  %v790 = vpack.c.b16 %v579, %v578
  %v791 = vpack.c.b16 %v581, %v580
  %v792 = vpack.c.b16 %v583, %v582
  %v793 = vpack.c.b16 %v585, %v584
  %v794 = vpack.c.b16 %v587, %v586
  %v795 = vpack.c.b16 %v589, %v588
  %v796 = vpack.c.b16 %v591, %v590
  %v797 = vpack.c.b16 %v593, %v592
  %v798 = vpack.c.b16 %v595, %v594
  %v799 = vpack.c.b16 %v597, %v596
  %v800 = vpack.c.b16 %v599, %v598
  %v801 = vpack.c.b16 %v601, %v600
  %v802 = vpack.c.b16 %v603, %v602
  %v803 = vpack.c.b16 %v605, %v604
  %v804 = vpack.c.b16 %v607, %v606
  %v805 = vpack.c.b16 %v609, %v608
  %v806 = vpack.c.b16 %v611, %v610
  %v807 = vpack.c.b16 %v613, %v612
  %v808 = vpack.c.b16 %v615, %v614
  %v809 = vpack.c.b16 %v617, %v616
  %v810 = vpack.c.b16 %v619, %v618
  %v811 = vpack.c.b16 %v621, %v620
  %v812 = vpack.c.b16 %v623, %v622
  %v813 = vpack.c.b16 %v625, %v624
  %v814 = vpack.c.b16 %v627, %v626
  %v815 = vpack.c.b16 %v629, %v628
  %v816 = vpack.c.b16 %v631, %v630
  %v817 = vpack.c.b16 %v633, %v632
  %v818 = vpack.c.b16 %v635, %v634
  %v819 = vpack.c.b16 %v637, %v636
  %v820 = vpack.c.b16 %v639, %v638
  %v821 = vpack.c.b16 %v641, %v640
  %v822 = vpack.c.b16 %v643, %v642
  %v823 = vpack.c.b16 %v645, %v644
  %v824 = vpack.c.b16 %v647, %v646
  %v825 = vpack.c.b16 %v649, %v648
  %v826 = vpack.c.b16 %v651, %v650
  %v827 = vpack.c.b16 %v653, %v652
  %v828 = vpack.c.b16 %v655, %v654
  %v829 = vpack.c.b16 %v657, %v656
  %v830 = vpack.c.b16 %v659, %v658
  %v831 = vpack.c.b16 %v661, %v660
  %v832 = vpack.c.b16 %v663, %v662
  %v833 = vpack.c.b16 %v665, %v664
  %v834 = vpack.c.b16 %v667, %v666
  %v835 = vpack.c.b16 %v669, %v668
  %v836 = vpack.c.b16 %v671, %v670
  %v837 = vpack.c.b16 %v673, %v672
  %v838 = vpack.c.b16 %v675, %v674
  %v839 = vpack.c.b16 %v677, %v676
  %v840 = vpack.c.b16 %v679, %v678
  %v841 = vpack.c.b16 %v681, %v680
  %v842 = vpack.c.b16 %v683, %v682
  %v843 = vpack.c.b16 %v685, %v684
  %v844 = vpack.c.b16 %v687, %v686
  %v845 = vpack.c.b16 %v689, %v688
  %v846 = vpack.c.b16 %v691, %v690
  %v847 = vpack.c.b16 %v693, %v692
  %v848 = vpack.c.b16 %v695, %v694
  %v849 = vpack.c.b16 %v697, %v696
  %v850 = vpack.c.b16 %v699, %v698
  %v851 = vpack.c.b16 %v701, %v700
  %v852 = vpack.c.b16 %v703, %v702
  %v853 = vpack.c.b16 %v705, %v704
  %v854 = vpack.c.b16 %v707, %v706
  %v855 = vpack.c.b16 %v709, %v708
  %v856 = vpack.c.b16 %v711, %v710
  %v857 = vpack.c.b16 %v713, %v712
  %v858 = vpack.c.b16 %v715, %v714
  %v859 = vpack.c.b16 %v717, %v716
  %v860 = vpack.c.b16 %v719, %v718
  %v861 = vpack.c.b16 %v721, %v720
  %v862 = vpack.c.b16 %v723, %v722
  %v863 = vpack.c.b16 %v725, %v724
  %v864 = vpack.c.b16 %v727, %v726
  %v865 = vpack.c.b16 %v729, %v728
  %v866 = vpack.c.b16 %v731, %v730
  %v867 = vpack.c.b16 %v733, %v732
  %v868 = vpack.c.b16 %v735, %v734
  %v869 = vpack.c.b16 %v737, %v736
  %v870 = vpack.c.b16 %v739, %v738
  %v871 = vpack.c.b16 %v741, %v740
  %v872 = vpack.c.b16 %v743, %v742
  %v873 = vpack.c.b16 %v745, %v744
  %v874 = vpack.c.b16 %v747, %v746
  %v875 = vpack.c.b16 %v749, %v748
  %v876 = vpack.c.b16 %v751, %v750
  %v877 = vpack.c.b16 %v753, %v752
  %v878 = vpack.c.b16 %v755, %v754
  %v879 = vpack.c.b16 %v757, %v756
  %v880 = vpack.c.b16 %v759, %v758
  %v881 = vpack.c.b16 %v761, %v760
  %v882 = vpack.c.b16 %v763, %v762
  %v883 = vpack.c.b16 %v765, %v764
  %v884 = vpack.c.b16 %v767, %v766
  %v885 = vpack.c.b16 %v769, %v768
  %v886 = vpack.c.b16 %v771, %v770
  %v887 = vpack.c.b16 %v773, %v772
  %v888 = vpack.c.b16 %v775, %v774
  %v889 = vpack.c.b16 %v777, %v776
  %1002 = vmatprep.subr.bf16.mxu0 0
  %1003 = vmatpush1.bf16.msra.mxu0 %v778
  %1004 = vmatprep.subr.bf16.mxu0 0
  %1005 = vmatpush1.bf16.msra.mxu0 %v779
  %1006 = vmatprep.subr.bf16.mxu0 0
  %1007 = vmatpush1.bf16.msra.mxu0 %v780
  %1008 = vmatprep.subr.bf16.mxu0 0
  %1009 = vmatpush1.bf16.msra.mxu0 %v781
  %1010 = vmatprep.subr.bf16.mxu0 0
  %1011 = vmatpush1.bf16.msra.mxu0 %v782
  %1012 = vmatprep.subr.bf16.mxu0 0
  %1013 = vmatpush1.bf16.msra.mxu0 %v783
  %1014 = vmatprep.subr.bf16.mxu0 0
  %1015 = vmatpush1.bf16.msra.mxu0 %v784
  %1016 = vmatprep.subr.bf16.mxu0 0
  %1017 = vmatpush1.bf16.msra.mxu0 %v785
  %1018 = vmatprep.subr.bf16.mxu0 0
  %1019 = vmatpush1.bf16.msra.mxu0 %v786
  %1020 = vmatprep.subr.bf16.mxu0 0
  %1021 = vmatpush1.bf16.msra.mxu0 %v787
  %1022 = vmatprep.subr.bf16.mxu0 0
  %1023 = vmatpush1.bf16.msra.mxu0 %v788
  %1024 = vmatprep.subr.bf16.mxu0 0
  %1025 = vmatpush1.bf16.msra.mxu0 %v789
  %1026 = vmatprep.subr.bf16.mxu0 0
  %1027 = vmatpush1.bf16.msra.mxu0 %v790
  %1028 = vmatprep.subr.bf16.mxu0 0
  %1029 = vmatpush1.bf16.msra.mxu0 %v791
  %1030 = vmatprep.subr.bf16.mxu0 0
  %1031 = vmatpush1.bf16.msra.mxu0 %v792
  %1032 = vmatprep.subr.bf16.mxu0 0
  %1033 = vmatpush1.bf16.msra.mxu0 %v793
  %1034 = vmatprep.mubr.bf16.mxu0 %v303
  %1035 = vmatmul.mubr.bf16.gmra.mrb[0].mxu0 %v302
  %v1036 = vpop.f32.mrb[0].mxu0
  %v1037 = vadd.f32 %v258, %v1036
  %v1038 = vpop.f32.mrb[0].mxu0
  %v1039 = vpop.f32.mrb[0].mxu0
  %v1040 = vadd.f32 %v258, %v1039
  %v1041 = vpop.f32.mrb[0].mxu0
  %1042 = vdwg.mxu0
  %1043 = vmatprep.subr.bf16.mxu0 0
  %1044 = vmatpush1.bf16.msra.mxu0 %v794
  %1045 = vmatprep.subr.bf16.mxu0 0
  %1046 = vmatpush1.bf16.msra.mxu0 %v795
  %1047 = vmatprep.subr.bf16.mxu0 0
  %1048 = vmatpush1.bf16.msra.mxu0 %v796
  %1049 = vmatprep.subr.bf16.mxu0 0
  %1050 = vmatpush1.bf16.msra.mxu0 %v797
  %1051 = vmatprep.subr.bf16.mxu0 0
  %1052 = vmatpush1.bf16.msra.mxu0 %v798
  %1053 = vmatprep.subr.bf16.mxu0 0
  %1054 = vmatpush1.bf16.msra.mxu0 %v799
  %1055 = vmatprep.subr.bf16.mxu0 0
  %1056 = vmatpush1.bf16.msra.mxu0 %v800
  %1057 = vmatprep.subr.bf16.mxu0 0
  %1058 = vmatpush1.bf16.msra.mxu0 %v801
  %1059 = vmatprep.subr.bf16.mxu0 0
  %1060 = vmatpush1.bf16.msra.mxu0 %v802
  %1061 = vmatprep.subr.bf16.mxu0 0
  %1062 = vmatpush1.bf16.msra.mxu0 %v803
  %1063 = vmatprep.subr.bf16.mxu0 0
  %1064 = vmatpush1.bf16.msra.mxu0 %v804
  %1065 = vmatprep.subr.bf16.mxu0 0
  %1066 = vmatpush1.bf16.msra.mxu0 %v805
  %1067 = vmatprep.subr.bf16.mxu0 0
  %1068 = vmatpush1.bf16.msra.mxu0 %v806
  %1069 = vmatprep.subr.bf16.mxu0 0
  %1070 = vmatpush1.bf16.msra.mxu0 %v807
  %1071 = vmatprep.subr.bf16.mxu0 0
  %1072 = vmatpush1.bf16.msra.mxu0 %v808
  %1073 = vmatprep.subr.bf16.mxu0 0
  %1074 = vmatpush1.bf16.msra.mxu0 %v809
  %1075 = vmatprep.mubr.bf16.mxu0 %v305
  %1076 = vmatmul.mubr.bf16.gmra.mrb[0].mxu0 %v304
  %v1077 = vpop.f32.mrb[0].mxu0
  %v1078 = vadd.f32 %v1037, %v1077
  %v1079 = vpop.f32.mrb[0].mxu0
  %v1080 = vpop.f32.mrb[0].mxu0
  %v1081 = vadd.f32 %v1040, %v1080
  %v1082 = vpop.f32.mrb[0].mxu0
  %1083 = vdwg.mxu0
  %1084 = vmatprep.subr.bf16.mxu0 0
  %1085 = vmatpush1.bf16.msra.mxu0 %v810
  %1086 = vmatprep.subr.bf16.mxu0 0
  %1087 = vmatpush1.bf16.msra.mxu0 %v811
  %1088 = vmatprep.subr.bf16.mxu0 0
  %1089 = vmatpush1.bf16.msra.mxu0 %v812
  %1090 = vmatprep.subr.bf16.mxu0 0
  %1091 = vmatpush1.bf16.msra.mxu0 %v813
  %1092 = vmatprep.subr.bf16.mxu0 0
  %1093 = vmatpush1.bf16.msra.mxu0 %v814
  %1094 = vmatprep.subr.bf16.mxu0 0
  %1095 = vmatpush1.bf16.msra.mxu0 %v815
  %1096 = vmatprep.subr.bf16.mxu0 0
  %1097 = vmatpush1.bf16.msra.mxu0 %v816
  %1098 = vmatprep.subr.bf16.mxu0 0
  %1099 = vmatpush1.bf16.msra.mxu0 %v817
  %1100 = vmatprep.subr.bf16.mxu0 0
  %1101 = vmatpush1.bf16.msra.mxu0 %v818
  %1102 = vmatprep.subr.bf16.mxu0 0
  %1103 = vmatpush1.bf16.msra.mxu0 %v819
  %1104 = vmatprep.subr.bf16.mxu0 0
  %1105 = vmatpush1.bf16.msra.mxu0 %v820
  %1106 = vmatprep.subr.bf16.mxu0 0
  %1107 = vmatpush1.bf16.msra.mxu0 %v821
  %1108 = vmatprep.subr.bf16.mxu0 0
  %1109 = vmatpush1.bf16.msra.mxu0 %v822
  %1110 = vmatprep.subr.bf16.mxu0 0
  %1111 = vmatpush1.bf16.msra.mxu0 %v823
  %1112 = vmatprep.subr.bf16.mxu0 0
  %1113 = vmatpush1.bf16.msra.mxu0 %v824
  %1114 = vmatprep.subr.bf16.mxu0 0
  %1115 = vmatpush1.bf16.msra.mxu0 %v825
  %1116 = vmatprep.mubr.bf16.mxu0 %v307
  %1117 = vmatmul.mubr.bf16.gmra.mrb[0].mxu0 %v306
  %v1118 = vpop.f32.mrb[0].mxu0
  %v1119 = vadd.f32 %v1078, %v1118
  %v1120 = vpop.f32.mrb[0].mxu0
  %v1121 = vpop.f32.mrb[0].mxu0
  %v1122 = vadd.f32 %v1081, %v1121
  %v1123 = vpop.f32.mrb[0].mxu0
  %1124 = vdwg.mxu0
  %1125 = vmatprep.subr.bf16.mxu0 0
  %1126 = vmatpush1.bf16.msra.mxu0 %v826
  %1127 = vmatprep.subr.bf16.mxu0 0
  %1128 = vmatpush1.bf16.msra.mxu0 %v827
  %1129 = vmatprep.subr.bf16.mxu0 0
  %1130 = vmatpush1.bf16.msra.mxu0 %v828
  %1131 = vmatprep.subr.bf16.mxu0 0
  %1132 = vmatpush1.bf16.msra.mxu0 %v829
  %1133 = vmatprep.subr.bf16.mxu0 0
  %1134 = vmatpush1.bf16.msra.mxu0 %v830
  %1135 = vmatprep.subr.bf16.mxu0 0
  %1136 = vmatpush1.bf16.msra.mxu0 %v831
  %1137 = vmatprep.subr.bf16.mxu0 0
  %1138 = vmatpush1.bf16.msra.mxu0 %v832
  %1139 = vmatprep.subr.bf16.mxu0 0
  %1140 = vmatpush1.bf16.msra.mxu0 %v833
  %1141 = vmatprep.subr.bf16.mxu0 0
  %1142 = vmatpush1.bf16.msra.mxu0 %v834
  %1143 = vmatprep.subr.bf16.mxu0 0
  %1144 = vmatpush1.bf16.msra.mxu0 %v835
  %1145 = vmatprep.subr.bf16.mxu0 0
  %1146 = vmatpush1.bf16.msra.mxu0 %v836
  %1147 = vmatprep.subr.bf16.mxu0 0
  %1148 = vmatpush1.bf16.msra.mxu0 %v837
  %1149 = vmatprep.subr.bf16.mxu0 0
  %1150 = vmatpush1.bf16.msra.mxu0 %v838
  %1151 = vmatprep.subr.bf16.mxu0 0
  %1152 = vmatpush1.bf16.msra.mxu0 %v839
  %1153 = vmatprep.subr.bf16.mxu0 0
  %1154 = vmatpush1.bf16.msra.mxu0 %v840
  %1155 = vmatprep.subr.bf16.mxu0 0
  %1156 = vmatpush1.bf16.msra.mxu0 %v841
  %1157 = vmatprep.mubr.bf16.mxu0 %v309
  %1158 = vmatmul.mubr.bf16.gmra.mrb[0].mxu0 %v308
  %v1159 = vpop.f32.mrb[0].mxu0
  %v1160 = vadd.f32 %v1119, %v1159
  %v1161 = vpop.f32.mrb[0].mxu0
  %v1162 = vpop.f32.mrb[0].mxu0
  %v1163 = vadd.f32 %v1122, %v1162
  %v1164 = vpop.f32.mrb[0].mxu0
  %1165 = vdwg.mxu0
  %1166 = vmatprep.subr.bf16.mxu0 0
  %1167 = vmatpush1.bf16.msra.mxu0 %v842
  %1168 = vmatprep.subr.bf16.mxu0 0
  %1169 = vmatpush1.bf16.msra.mxu0 %v843
  %1170 = vmatprep.subr.bf16.mxu0 0
  %1171 = vmatpush1.bf16.msra.mxu0 %v844
  %1172 = vmatprep.subr.bf16.mxu0 0
  %1173 = vmatpush1.bf16.msra.mxu0 %v845
  %1174 = vmatprep.subr.bf16.mxu0 0
  %1175 = vmatpush1.bf16.msra.mxu0 %v846
  %1176 = vmatprep.subr.bf16.mxu0 0
  %1177 = vmatpush1.bf16.msra.mxu0 %v847
  %1178 = vmatprep.subr.bf16.mxu0 0
  %1179 = vmatpush1.bf16.msra.mxu0 %v848
  %1180 = vmatprep.subr.bf16.mxu0 0
  %1181 = vmatpush1.bf16.msra.mxu0 %v849
  %1182 = vmatprep.subr.bf16.mxu0 0
  %1183 = vmatpush1.bf16.msra.mxu0 %v850
  %1184 = vmatprep.subr.bf16.mxu0 0
  %1185 = vmatpush1.bf16.msra.mxu0 %v851
  %1186 = vmatprep.subr.bf16.mxu0 0
  %1187 = vmatpush1.bf16.msra.mxu0 %v852
  %1188 = vmatprep.subr.bf16.mxu0 0
  %1189 = vmatpush1.bf16.msra.mxu0 %v853
  %1190 = vmatprep.subr.bf16.mxu0 0
  %1191 = vmatpush1.bf16.msra.mxu0 %v854
  %1192 = vmatprep.subr.bf16.mxu0 0
  %1193 = vmatpush1.bf16.msra.mxu0 %v855
  %1194 = vmatprep.subr.bf16.mxu0 0
  %1195 = vmatpush1.bf16.msra.mxu0 %v856
  %1196 = vmatprep.subr.bf16.mxu0 0
  %1197 = vmatpush1.bf16.msra.mxu0 %v857
  %1198 = vmatprep.mubr.bf16.mxu0 %v311
  %1199 = vmatmul.mubr.bf16.gmra.mrb[0].mxu0 %v310
  %v1200 = vpop.f32.mrb[0].mxu0
  %v1201 = vadd.f32 %v1160, %v1200
  %v1202 = vpop.f32.mrb[0].mxu0
  %v1203 = vpop.f32.mrb[0].mxu0
  %v1204 = vadd.f32 %v1163, %v1203
  %v1205 = vpop.f32.mrb[0].mxu0
  %1206 = vdwg.mxu0
  %1207 = vmatprep.subr.bf16.mxu0 0
  %1208 = vmatpush1.bf16.msra.mxu0 %v858
  %1209 = vmatprep.subr.bf16.mxu0 0
  %1210 = vmatpush1.bf16.msra.mxu0 %v859
  %1211 = vmatprep.subr.bf16.mxu0 0
  %1212 = vmatpush1.bf16.msra.mxu0 %v860
  %1213 = vmatprep.subr.bf16.mxu0 0
  %1214 = vmatpush1.bf16.msra.mxu0 %v861
  %1215 = vmatprep.subr.bf16.mxu0 0
  %1216 = vmatpush1.bf16.msra.mxu0 %v862
  %1217 = vmatprep.subr.bf16.mxu0 0
  %1218 = vmatpush1.bf16.msra.mxu0 %v863
  %1219 = vmatprep.subr.bf16.mxu0 0
  %1220 = vmatpush1.bf16.msra.mxu0 %v864
  %1221 = vmatprep.subr.bf16.mxu0 0
  %1222 = vmatpush1.bf16.msra.mxu0 %v865
  %1223 = vmatprep.subr.bf16.mxu0 0
  %1224 = vmatpush1.bf16.msra.mxu0 %v866
  %1225 = vmatprep.subr.bf16.mxu0 0
  %1226 = vmatpush1.bf16.msra.mxu0 %v867
  %1227 = vmatprep.subr.bf16.mxu0 0
  %1228 = vmatpush1.bf16.msra.mxu0 %v868
  %1229 = vmatprep.subr.bf16.mxu0 0
  %1230 = vmatpush1.bf16.msra.mxu0 %v869
  %1231 = vmatprep.subr.bf16.mxu0 0
  %1232 = vmatpush1.bf16.msra.mxu0 %v870
  %1233 = vmatprep.subr.bf16.mxu0 0
  %1234 = vmatpush1.bf16.msra.mxu0 %v871
  %1235 = vmatprep.subr.bf16.mxu0 0
  %1236 = vmatpush1.bf16.msra.mxu0 %v872
  %1237 = vmatprep.subr.bf16.mxu0 0
  %1238 = vmatpush1.bf16.msra.mxu0 %v873
  %1239 = vmatprep.mubr.bf16.mxu0 %v313
  %1240 = vmatmul.mubr.bf16.gmra.mrb[0].mxu0 %v312
  %v1241 = vpop.f32.mrb[0].mxu0
  %v1242 = vadd.f32 %v1201, %v1241
  %v1243 = vpop.f32.mrb[0].mxu0
  %v1244 = vpop.f32.mrb[0].mxu0
  %v1245 = vadd.f32 %v1204, %v1244
  %v1246 = vpop.f32.mrb[0].mxu0
  %1247 = vdwg.mxu0
  %1248 = vmatprep.subr.bf16.mxu0 0
  %1249 = vmatpush1.bf16.msra.mxu0 %v874
  %1250 = vmatprep.subr.bf16.mxu0 0
  %1251 = vmatpush1.bf16.msra.mxu0 %v875
  %1252 = vmatprep.subr.bf16.mxu0 0
  %1253 = vmatpush1.bf16.msra.mxu0 %v876
  %1254 = vmatprep.subr.bf16.mxu0 0
  %1255 = vmatpush1.bf16.msra.mxu0 %v877
  %1256 = vmatprep.subr.bf16.mxu0 0
  %1257 = vmatpush1.bf16.msra.mxu0 %v878
  %1258 = vmatprep.subr.bf16.mxu0 0
  %1259 = vmatpush1.bf16.msra.mxu0 %v879
  %1260 = vmatprep.subr.bf16.mxu0 0
  %1261 = vmatpush1.bf16.msra.mxu0 %v880
  %1262 = vmatprep.subr.bf16.mxu0 0
  %1263 = vmatpush1.bf16.msra.mxu0 %v881
  %1264 = vmatprep.subr.bf16.mxu0 0
  %1265 = vmatpush1.bf16.msra.mxu0 %v882
  %1266 = vmatprep.subr.bf16.mxu0 0
  %1267 = vmatpush1.bf16.msra.mxu0 %v883
  %1268 = vmatprep.subr.bf16.mxu0 0
  %1269 = vmatpush1.bf16.msra.mxu0 %v884
  %1270 = vmatprep.subr.bf16.mxu0 0
  %1271 = vmatpush1.bf16.msra.mxu0 %v885
  %1272 = vmatprep.subr.bf16.mxu0 0
  %1273 = vmatpush1.bf16.msra.mxu0 %v886
  %1274 = vmatprep.subr.bf16.mxu0 0
  %1275 = vmatpush1.bf16.msra.mxu0 %v887
  %1276 = vmatprep.subr.bf16.mxu0 0
  %1277 = vmatpush1.bf16.msra.mxu0 %v888
  %1278 = vmatprep.subr.bf16.mxu0 0
  %1279 = vmatpush1.bf16.msra.mxu0 %v889
  %1280 = vmatprep.mubr.bf16.mxu0 %v315
  %1281 = vmatmul.mubr.bf16.gmra.mrb[0].mxu0 %v314
  %v1282 = vpop.f32.mrb[0].mxu0
  %v1283 = vadd.f32 %v1242, %v1282
  %v1284 = vpop.f32.mrb[0].mxu0
  %v1285 = vpop.f32.mrb[0].mxu0
  %v1286 = vadd.f32 %v1245, %v1285
  %v1287 = vpop.f32.mrb[0].mxu0
  %1288 = vdwg.mxu0
  %v1289 = vmax.f32 %v1283, 0.0
  %v1290 = vmax.f32 %v1286, 0.0
  %v1291 = vpack.c.bf16 %v1290, %v1289
  %v1293 = vunpack.c.l.b16 %v1291
  %v1294 = vunpack.c.h.b16 %v1291
  %v1295 = vpack.c.b16 %v1293, %v1293
  %v1296 = vpack.c.b16 %v1294, %v1294
  %1299 = vst [vmem:[%s3] sm:$0xf] %v1295
  %1300 = vst [vmem:[%s3 + $0x4] sm:$0xf] %v1296
  // Predicated region
  $region14: #{net_forward.8} parent=0 // pred_check
    _
  $region15: #{net_forward.8} parent=0 // pred_check_branch
    %1302 = sbr.rel (0) target = $region17
  $region16: #{net_forward.8} parent=0 // pred_region
    _
  $region17: #{net_forward.8} parent=0 // pred_fallthru
    _
  // Predicated region
  $region18: #{net_forward.8} parent=0 // pred_check
    _
  $region19: #{net_forward.8} parent=0 // pred_check_branch
    %1304 = sbr.rel (0) target = $region21
  $region20: #{net_forward.8} parent=0 // pred_region
    _
  $region21: #{net_forward.8} parent=0 // pred_fallthru
    _

// kernel: net_forward.9
$region0: #{net_forward.9}
  #allocation0 [shape = 'u32[]', space=smem, size = 0x4, offset = 0x4, fixed_abs, tag = 'smem constant byte address 0x4 - core index']
  #allocation1 [shape = 'u32[144,128]{1,0:T(1,128)}', space=vmem, size = 0x12000, scoped, tag = 'internal scratch']
  %s0 = inlined_call_operand.vmem [shape: bf16[16,3456], index: 0, kind: input, shape index: {}]
  %s1 = inlined_call_operand.vmem [shape: bf16[3456,128], index: 1, kind: input, shape index: {}]
  %s2 = inlined_call_operand.vmem [shape: f32[1,128], index: 2, kind: input, shape index: {}]
  %s3 = inlined_call_operand.vmem [shape: bf16[16,128], index: 3, kind: output, shape index: {}]
  %s4 = sld [smem:[#allocation0]]
  $region22: #{net_forward.9} parent=0
    _
  %s6 = ssub.s32 1, %s4
  %s7 = scalar_select 0, %s6, %s4
  // Predicated region
  $region2: #{net_forward.9} parent=0 // pred_check
    _
  $region3: #{net_forward.9} parent=0 // pred_check_branch
    %9 = sbr.rel (0) target = $region5
  $region4: #{net_forward.9} parent=0 // pred_region
    _
  $region5: #{net_forward.9} parent=0 // pred_fallthru
    _
  // Predicated region
  $region6: #{net_forward.9} parent=0 // pred_check
    _
  $region7: #{net_forward.9} parent=0 // pred_check_branch
    %11 = sbr.rel (0) target = $region9
  $region8: #{net_forward.9} parent=0 // pred_region
    _
  $region9: #{net_forward.9} parent=0 // pred_fallthru
    _
  // Predicated region
  $region10: #{net_forward.9} parent=0 // pred_check
    _
  $region11: #{net_forward.9} parent=0 // pred_check_branch
    %13 = sbr.rel (0) target = $region13
  $region12: #{net_forward.9} parent=0 // pred_region
    _
  $region13: #{net_forward.9} parent=0 // pred_fallthru
    _
  %v15 = vld [vmem:[%s0] sm:$0xff]
  %v16 = vld [vmem:[%s0 + $0x8] sm:$0xff]
  %v17 = vld [vmem:[%s0 + $0x10] sm:$0xff]
  %v18 = vld [vmem:[%s0 + $0x18] sm:$0xff]
  %v19 = vld [vmem:[%s0 + $0x20] sm:$0xff]
  %v20 = vld [vmem:[%s0 + $0x28] sm:$0xff]
  %v21 = vld [vmem:[%s0 + $0x30] sm:$0xff]
  %v22 = vld [vmem:[%s0 + $0x38] sm:$0xff]
  %v23 = vld [vmem:[%s0 + $0x40] sm:$0xff]
  %v24 = vld [vmem:[%s0 + $0x48] sm:$0xff]
  %v25 = vld [vmem:[%s0 + $0x50] sm:$0xff]
  %v26 = vld [vmem:[%s0 + $0x58] sm:$0xff]
  %v27 = vld [vmem:[%s0 + $0x60] sm:$0xff]
  %v28 = vld [vmem:[%s0 + $0x68] sm:$0xf]
  %v29 = vld [vmem:[%s0 + $0x6c] sm:$0xff]
  %v30 = vld [vmem:[%s0 + $0x74] sm:$0xff]
  %v31 = vld [vmem:[%s0 + $0x7c] sm:$0xff]
  %v32 = vld [vmem:[%s0 + $0x84] sm:$0xff]
  %v33 = vld [vmem:[%s0 + $0x8c] sm:$0xff]
  %v34 = vld [vmem:[%s0 + $0x94] sm:$0xff]
  %v35 = vld [vmem:[%s0 + $0x9c] sm:$0xff]
  %v36 = vld [vmem:[%s0 + $0xa4] sm:$0xff]
  %v37 = vld [vmem:[%s0 + $0xac] sm:$0xff]
  %v38 = vld [vmem:[%s0 + $0xb4] sm:$0xff]
  %v39 = vld [vmem:[%s0 + $0xbc] sm:$0xff]
  %v40 = vld [vmem:[%s0 + $0xc4] sm:$0xff]
  %v41 = vld [vmem:[%s0 + $0xcc] sm:$0xff]
  %v42 = vld [vmem:[%s0 + $0xd4] sm:$0xf]
  %v43 = vld [vmem:[%s1] sm:$0xf]
  %v44 = vld [vmem:[%s1 + $0x4] sm:$0xf]
  %v45 = vld [vmem:[%s1 + $0x8] sm:$0xf]
  %v46 = vld [vmem:[%s1 + $0xc] sm:$0xf]
  %v47 = vld [vmem:[%s1 + $0x10] sm:$0xf]
  %v48 = vld [vmem:[%s1 + $0x14] sm:$0xf]
  %v49 = vld [vmem:[%s1 + $0x18] sm:$0xf]
  %v50 = vld [vmem:[%s1 + $0x1c] sm:$0xf]
  %v51 = vld [vmem:[%s1 + $0x20] sm:$0xf]
  %v52 = vld [vmem:[%s1 + $0x24] sm:$0xf]
  %v53 = vld [vmem:[%s1 + $0x28] sm:$0xf]
  %v54 = vld [vmem:[%s1 + $0x2c] sm:$0xf]
  %v55 = vld [vmem:[%s1 + $0x30] sm:$0xf]
  %v56 = vld [vmem:[%s1 + $0x34] sm:$0xf]
  %v57 = vld [vmem:[%s1 + $0x38] sm:$0xf]
  %v58 = vld [vmem:[%s1 + $0x3c] sm:$0xf]
  %v59 = vld [vmem:[%s1 + $0x40] sm:$0xf]
  %v60 = vld [vmem:[%s1 + $0x44] sm:$0xf]
  %v61 = vld [vmem:[%s1 + $0x48] sm:$0xf]
  %v62 = vld [vmem:[%s1 + $0x4c] sm:$0xf]
  %v63 = vld [vmem:[%s1 + $0x50] sm:$0xf]
  %v64 = vld [vmem:[%s1 + $0x54] sm:$0xf]
  %v65 = vld [vmem:[%s1 + $0x58] sm:$0xf]
  %v66 = vld [vmem:[%s1 + $0x5c] sm:$0xf]
  %v67 = vld [vmem:[%s1 + $0x60] sm:$0xf]
  %v68 = vld [vmem:[%s1 + $0x64] sm:$0xf]
  %v69 = vld [vmem:[%s1 + $0x68] sm:$0xf]
  %v70 = vld [vmem:[%s1 + $0x6c] sm:$0xf]
  %v71 = vld [vmem:[%s1 + $0x70] sm:$0xf]
  %v72 = vld [vmem:[%s1 + $0x74] sm:$0xf]
  %v73 = vld [vmem:[%s1 + $0x78] sm:$0xf]
  %v74 = vld [vmem:[%s1 + $0x7c] sm:$0xf]
  %v75 = vld [vmem:[%s1 + $0x80] sm:$0xf]
  %v76 = vld [vmem:[%s1 + $0x84] sm:$0xf]
  %v77 = vld [vmem:[%s1 + $0x88] sm:$0xf]
  %v78 = vld [vmem:[%s1 + $0x8c] sm:$0xf]
  %v79 = vld [vmem:[%s1 + $0x90] sm:$0xf]
  %v80 = vld [vmem:[%s1 + $0x94] sm:$0xf]
  %v81 = vld [vmem:[%s1 + $0x98] sm:$0xf]
  %v82 = vld [vmem:[%s1 + $0x9c] sm:$0xf]
  %v83 = vld [vmem:[%s1 + $0xa0] sm:$0xf]
  %v84 = vld [vmem:[%s1 + $0xa4] sm:$0xf]
  %v85 = vld [vmem:[%s1 + $0xa8] sm:$0xf]
  %v86 = vld [vmem:[%s1 + $0xac] sm:$0xf]
  %v87 = vld [vmem:[%s1 + $0xb0] sm:$0xf]
  %v88 = vld [vmem:[%s1 + $0xb4] sm:$0xf]
  %v89 = vld [vmem:[%s1 + $0xb8] sm:$0xf]
  %v90 = vld [vmem:[%s1 + $0xbc] sm:$0xf]
  %v91 = vld [vmem:[%s1 + $0xc0] sm:$0xf]
  %v92 = vld [vmem:[%s1 + $0xc4] sm:$0xf]
  %v93 = vld [vmem:[%s1 + $0xc8] sm:$0xf]
  %v94 = vld [vmem:[%s1 + $0xcc] sm:$0xf]
  %v95 = vld [vmem:[%s1 + $0xd0] sm:$0xf]
  %v96 = vld [vmem:[%s1 + $0xd4] sm:$0xf]
  %v97 = vld [vmem:[%s1 + $0xd8] sm:$0xf]
  %v98 = vld [vmem:[%s1 + $0xdc] sm:$0xf]
  %v99 = vld [vmem:[%s1 + $0xe0] sm:$0xf]
  %v100 = vld [vmem:[%s1 + $0xe4] sm:$0xf]
  %v101 = vld [vmem:[%s1 + $0xe8] sm:$0xf]
  %v102 = vld [vmem:[%s1 + $0xec] sm:$0xf]
  %v103 = vld [vmem:[%s1 + $0xf0] sm:$0xf]
  %v104 = vld [vmem:[%s1 + $0xf4] sm:$0xf]
  %v105 = vld [vmem:[%s1 + $0xf8] sm:$0xf]
  %v106 = vld [vmem:[%s1 + $0xfc] sm:$0xf]
  %v107 = vld [vmem:[%s1 + $0x100] sm:$0xf]
  %v108 = vld [vmem:[%s1 + $0x104] sm:$0xf]
  %v109 = vld [vmem:[%s1 + $0x108] sm:$0xf]
  %v110 = vld [vmem:[%s1 + $0x10c] sm:$0xf]
  %v111 = vld [vmem:[%s1 + $0x110] sm:$0xf]
  %v112 = vld [vmem:[%s1 + $0x114] sm:$0xf]
  %v113 = vld [vmem:[%s1 + $0x118] sm:$0xf]
  %v114 = vld [vmem:[%s1 + $0x11c] sm:$0xf]
  %v115 = vld [vmem:[%s1 + $0x120] sm:$0xf]
  %v116 = vld [vmem:[%s1 + $0x124] sm:$0xf]
  %v117 = vld [vmem:[%s1 + $0x128] sm:$0xf]
  %v118 = vld [vmem:[%s1 + $0x12c] sm:$0xf]
  %v119 = vld [vmem:[%s1 + $0x130] sm:$0xf]
  %v120 = vld [vmem:[%s1 + $0x134] sm:$0xf]
  %v121 = vld [vmem:[%s1 + $0x138] sm:$0xf]
  %v122 = vld [vmem:[%s1 + $0x13c] sm:$0xf]
  %v123 = vld [vmem:[%s1 + $0x140] sm:$0xf]
  %v124 = vld [vmem:[%s1 + $0x144] sm:$0xf]
  %v125 = vld [vmem:[%s1 + $0x148] sm:$0xf]
  %v126 = vld [vmem:[%s1 + $0x14c] sm:$0xf]
  %v127 = vld [vmem:[%s1 + $0x150] sm:$0xf]
  %v128 = vld [vmem:[%s1 + $0x154] sm:$0xf]
  %v129 = vld [vmem:[%s1 + $0x158] sm:$0xf]
  %v130 = vld [vmem:[%s1 + $0x15c] sm:$0xf]
  %v131 = vld [vmem:[%s1 + $0x160] sm:$0xf]
  %v132 = vld [vmem:[%s1 + $0x164] sm:$0xf]
  %v133 = vld [vmem:[%s1 + $0x168] sm:$0xf]
  %v134 = vld [vmem:[%s1 + $0x16c] sm:$0xf]
  %v135 = vld [vmem:[%s1 + $0x170] sm:$0xf]
  %v136 = vld [vmem:[%s1 + $0x174] sm:$0xf]
  %v137 = vld [vmem:[%s1 + $0x178] sm:$0xf]
  %v138 = vld [vmem:[%s1 + $0x17c] sm:$0xf]
  %v139 = vld [vmem:[%s1 + $0x180] sm:$0xf]
  %v140 = vld [vmem:[%s1 + $0x184] sm:$0xf]
  %v141 = vld [vmem:[%s1 + $0x188] sm:$0xf]
  %v142 = vld [vmem:[%s1 + $0x18c] sm:$0xf]
  %v143 = vld [vmem:[%s1 + $0x190] sm:$0xf]
  %v144 = vld [vmem:[%s1 + $0x194] sm:$0xf]
  %v145 = vld [vmem:[%s1 + $0x198] sm:$0xf]
  %v146 = vld [vmem:[%s1 + $0x19c] sm:$0xf]
  %v147 = vld [vmem:[%s1 + $0x1a0] sm:$0xf]
  %v148 = vld [vmem:[%s1 + $0x1a4] sm:$0xf]
  %v149 = vld [vmem:[%s1 + $0x1a8] sm:$0xf]
  %v150 = vld [vmem:[%s1 + $0x1ac] sm:$0xf]
  %v151 = vld [vmem:[%s1 + $0x1b0] sm:$0xf]
  %v152 = vld [vmem:[%s1 + $0x1b4] sm:$0xf]
  %v153 = vld [vmem:[%s1 + $0x1b8] sm:$0xf]
  %v154 = vld [vmem:[%s1 + $0x1bc] sm:$0xf]
  %v155 = vld [vmem:[%s1 + $0x1c0] sm:$0xf]
  %v156 = vld [vmem:[%s1 + $0x1c4] sm:$0xf]
  %v157 = vld [vmem:[%s1 + $0x1c8] sm:$0xf]
  %v158 = vld [vmem:[%s1 + $0x1cc] sm:$0xf]
  %v159 = vld [vmem:[%s1 + $0x1d0] sm:$0xf]
  %v160 = vld [vmem:[%s1 + $0x1d4] sm:$0xf]
  %v161 = vld [vmem:[%s1 + $0x1d8] sm:$0xf]
  %v162 = vld [vmem:[%s1 + $0x1dc] sm:$0xf]
  %v163 = vld [vmem:[%s1 + $0x1e0] sm:$0xf]
  %v164 = vld [vmem:[%s1 + $0x1e4] sm:$0xf]
  %v165 = vld [vmem:[%s1 + $0x1e8] sm:$0xf]
  %v166 = vld [vmem:[%s1 + $0x1ec] sm:$0xf]
  %v167 = vld [vmem:[%s1 + $0x1f0] sm:$0xf]
  %v168 = vld [vmem:[%s1 + $0x1f4] sm:$0xf]
  %v169 = vld [vmem:[%s1 + $0x1f8] sm:$0xf]
  %v170 = vld [vmem:[%s1 + $0x1fc] sm:$0xf]
  %v171 = vld [vmem:[%s1 + $0x200] sm:$0xf]
  %v172 = vld [vmem:[%s1 + $0x204] sm:$0xf]
  %v173 = vld [vmem:[%s1 + $0x208] sm:$0xf]
  %v174 = vld [vmem:[%s1 + $0x20c] sm:$0xf]
  %v175 = vld [vmem:[%s1 + $0x210] sm:$0xf]
  %v176 = vld [vmem:[%s1 + $0x214] sm:$0xf]
  %v177 = vld [vmem:[%s1 + $0x218] sm:$0xf]
  %v178 = vld [vmem:[%s1 + $0x21c] sm:$0xf]
  %v179 = vld [vmem:[%s1 + $0x220] sm:$0xf]
  %v180 = vld [vmem:[%s1 + $0x224] sm:$0xf]
  %v181 = vld [vmem:[%s1 + $0x228] sm:$0xf]
  %v182 = vld [vmem:[%s1 + $0x22c] sm:$0xf]
  %v183 = vld [vmem:[%s1 + $0x230] sm:$0xf]
  %v184 = vld [vmem:[%s1 + $0x234] sm:$0xf]
  %v185 = vld [vmem:[%s1 + $0x238] sm:$0xf]
  %v186 = vld [vmem:[%s1 + $0x23c] sm:$0xf]
  %v187 = vld [vmem:[%s1 + $0x240] sm:$0xf]
  %v188 = vld [vmem:[%s1 + $0x244] sm:$0xf]
  %v189 = vld [vmem:[%s1 + $0x248] sm:$0xf]
  %v190 = vld [vmem:[%s1 + $0x24c] sm:$0xf]
  %v191 = vld [vmem:[%s1 + $0x250] sm:$0xf]
  %v192 = vld [vmem:[%s1 + $0x254] sm:$0xf]
  %v193 = vld [vmem:[%s1 + $0x258] sm:$0xf]
  %v194 = vld [vmem:[%s1 + $0x25c] sm:$0xf]
  %v195 = vld [vmem:[%s1 + $0x260] sm:$0xf]
  %v196 = vld [vmem:[%s1 + $0x264] sm:$0xf]
  %v197 = vld [vmem:[%s1 + $0x268] sm:$0xf]
  %v198 = vld [vmem:[%s1 + $0x26c] sm:$0xf]
  %v199 = vld [vmem:[%s1 + $0x270] sm:$0xf]
  %v200 = vld [vmem:[%s1 + $0x274] sm:$0xf]
  %v201 = vld [vmem:[%s1 + $0x278] sm:$0xf]
  %v202 = vld [vmem:[%s1 + $0x27c] sm:$0xf]
  %v203 = vld [vmem:[%s1 + $0x280] sm:$0xf]
  %v204 = vld [vmem:[%s1 + $0x284] sm:$0xf]
  %v205 = vld [vmem:[%s1 + $0x288] sm:$0xf]
  %v206 = vld [vmem:[%s1 + $0x28c] sm:$0xf]
  %v207 = vld [vmem:[%s1 + $0x290] sm:$0xf]
  %v208 = vld [vmem:[%s1 + $0x294] sm:$0xf]
  %v209 = vld [vmem:[%s1 + $0x298] sm:$0xf]
  %v210 = vld [vmem:[%s1 + $0x29c] sm:$0xf]
  %v211 = vld [vmem:[%s1 + $0x2a0] sm:$0xf]
  %v212 = vld [vmem:[%s1 + $0x2a4] sm:$0xf]
  %v213 = vld [vmem:[%s1 + $0x2a8] sm:$0xf]
  %v214 = vld [vmem:[%s1 + $0x2ac] sm:$0xf]
  %v215 = vld [vmem:[%s1 + $0x2b0] sm:$0xf]
  %v216 = vld [vmem:[%s1 + $0x2b4] sm:$0xf]
  %v217 = vld [vmem:[%s1 + $0x2b8] sm:$0xf]
  %v218 = vld [vmem:[%s1 + $0x2bc] sm:$0xf]
  %v219 = vld [vmem:[%s1 + $0x2c0] sm:$0xf]
  %v220 = vld [vmem:[%s1 + $0x2c4] sm:$0xf]
  %v221 = vld [vmem:[%s1 + $0x2c8] sm:$0xf]
  %v222 = vld [vmem:[%s1 + $0x2cc] sm:$0xf]
  %v223 = vld [vmem:[%s1 + $0x2d0] sm:$0xf]
  %v224 = vld [vmem:[%s1 + $0x2d4] sm:$0xf]
  %v225 = vld [vmem:[%s1 + $0x2d8] sm:$0xf]
  %v226 = vld [vmem:[%s1 + $0x2dc] sm:$0xf]
  %v227 = vld [vmem:[%s1 + $0x2e0] sm:$0xf]
  %v228 = vld [vmem:[%s1 + $0x2e4] sm:$0xf]
  %v229 = vld [vmem:[%s1 + $0x2e8] sm:$0xf]
  %v230 = vld [vmem:[%s1 + $0x2ec] sm:$0xf]
  %v231 = vld [vmem:[%s1 + $0x2f0] sm:$0xf]
  %v232 = vld [vmem:[%s1 + $0x2f4] sm:$0xf]
  %v233 = vld [vmem:[%s1 + $0x2f8] sm:$0xf]
  %v234 = vld [vmem:[%s1 + $0x2fc] sm:$0xf]
  %v235 = vld [vmem:[%s1 + $0x300] sm:$0xf]
  %v236 = vld [vmem:[%s1 + $0x304] sm:$0xf]
  %v237 = vld [vmem:[%s1 + $0x308] sm:$0xf]
  %v238 = vld [vmem:[%s1 + $0x30c] sm:$0xf]
  %v239 = vld [vmem:[%s1 + $0x310] sm:$0xf]
  %v240 = vld [vmem:[%s1 + $0x314] sm:$0xf]
  %v241 = vld [vmem:[%s1 + $0x318] sm:$0xf]
  %v242 = vld [vmem:[%s1 + $0x31c] sm:$0xf]
  %v243 = vld [vmem:[%s1 + $0x320] sm:$0xf]
  %v244 = vld [vmem:[%s1 + $0x324] sm:$0xf]
  %v245 = vld [vmem:[%s1 + $0x328] sm:$0xf]
  %v246 = vld [vmem:[%s1 + $0x32c] sm:$0xf]
  %v247 = vld [vmem:[%s1 + $0x330] sm:$0xf]
  %v248 = vld [vmem:[%s1 + $0x334] sm:$0xf]
  %v249 = vld [vmem:[%s1 + $0x338] sm:$0xf]
  %v250 = vld [vmem:[%s1 + $0x33c] sm:$0xf]
  %v251 = vld [vmem:[%s1 + $0x340] sm:$0xf]
  %v252 = vld [vmem:[%s1 + $0x344] sm:$0xf]
  %v253 = vld [vmem:[%s1 + $0x348] sm:$0xf]
  %v254 = vld [vmem:[%s1 + $0x34c] sm:$0xf]
  %v255 = vld [vmem:[%s1 + $0x350] sm:$0xf]
  %v256 = vld [vmem:[%s1 + $0x354] sm:$0xf]
  %v257 = vld [vmem:[%s1 + $0x358] sm:$0xf]
  %v258 = vld [vmem:[%s1 + $0x35c] sm:$0xf]
  %v259 = vld [vmem:[%s1 + $0x360] sm:$0xf]
  %v260 = vld [vmem:[%s1 + $0x364] sm:$0xf]
  %v261 = vld [vmem:[%s1 + $0x368] sm:$0xf]
  %v262 = vld [vmem:[%s1 + $0x36c] sm:$0xf]
  %v263 = vld [vmem:[%s1 + $0x370] sm:$0xf]
  %v264 = vld [vmem:[%s1 + $0x374] sm:$0xf]
  %v265 = vld [vmem:[%s1 + $0x378] sm:$0xf]
  %v266 = vld [vmem:[%s1 + $0x37c] sm:$0xf]
  %v267 = vld [vmem:[%s1 + $0x380] sm:$0xf]
  %v268 = vld [vmem:[%s1 + $0x384] sm:$0xf]
  %v269 = vld [vmem:[%s1 + $0x388] sm:$0xf]
  %v270 = vld [vmem:[%s1 + $0x38c] sm:$0xf]
  %v271 = vld [vmem:[%s1 + $0x390] sm:$0xf]
  %v272 = vld [vmem:[%s1 + $0x394] sm:$0xf]
  %v273 = vld [vmem:[%s1 + $0x398] sm:$0xf]
  %v274 = vld [vmem:[%s1 + $0x39c] sm:$0xf]
  %v275 = vld [vmem:[%s1 + $0x3a0] sm:$0xf]
  %v276 = vld [vmem:[%s1 + $0x3a4] sm:$0xf]
  %v277 = vld [vmem:[%s1 + $0x3a8] sm:$0xf]
  %v278 = vld [vmem:[%s1 + $0x3ac] sm:$0xf]
  %v279 = vld [vmem:[%s1 + $0x3b0] sm:$0xf]
  %v280 = vld [vmem:[%s1 + $0x3b4] sm:$0xf]
  %v281 = vld [vmem:[%s1 + $0x3b8] sm:$0xf]
  %v282 = vld [vmem:[%s1 + $0x3bc] sm:$0xf]
  %v283 = vld [vmem:[%s1 + $0x3c0] sm:$0xf]
  %v284 = vld [vmem:[%s1 + $0x3c4] sm:$0xf]
  %v285 = vld [vmem:[%s1 + $0x3c8] sm:$0xf]
  %v286 = vld [vmem:[%s1 + $0x3cc] sm:$0xf]
  %v287 = vld [vmem:[%s1 + $0x3d0] sm:$0xf]
  %v288 = vld [vmem:[%s1 + $0x3d4] sm:$0xf]
  %v289 = vld [vmem:[%s1 + $0x3d8] sm:$0xf]
  %v290 = vld [vmem:[%s1 + $0x3dc] sm:$0xf]
  %v291 = vld [vmem:[%s1 + $0x3e0] sm:$0xf]
  %v292 = vld [vmem:[%s1 + $0x3e4] sm:$0xf]
  %v293 = vld [vmem:[%s1 + $0x3e8] sm:$0xf]
  %v294 = vld [vmem:[%s1 + $0x3ec] sm:$0xf]
  %v295 = vld [vmem:[%s1 + $0x3f0] sm:$0xf]
  %v296 = vld [vmem:[%s1 + $0x3f4] sm:$0xf]
  %v297 = vld [vmem:[%s1 + $0x3f8] sm:$0xf]
  %v298 = vld [vmem:[%s1 + $0x3fc] sm:$0xf]
  %v299 = vld [vmem:[%s1 + $0x400] sm:$0xf]
  %v300 = vld [vmem:[%s1 + $0x404] sm:$0xf]
  %v301 = vld [vmem:[%s1 + $0x408] sm:$0xf]
  %v302 = vld [vmem:[%s1 + $0x40c] sm:$0xf]
  %v303 = vld [vmem:[%s1 + $0x410] sm:$0xf]
  %v304 = vld [vmem:[%s1 + $0x414] sm:$0xf]
  %v305 = vld [vmem:[%s1 + $0x418] sm:$0xf]
  %v306 = vld [vmem:[%s1 + $0x41c] sm:$0xf]
  %v307 = vld [vmem:[%s1 + $0x420] sm:$0xf]
  %v308 = vld [vmem:[%s1 + $0x424] sm:$0xf]
  %v309 = vld [vmem:[%s1 + $0x428] sm:$0xf]
  %v310 = vld [vmem:[%s1 + $0x42c] sm:$0xf]
  %v311 = vld [vmem:[%s1 + $0x430] sm:$0xf]
  %v312 = vld [vmem:[%s1 + $0x434] sm:$0xf]
  %v313 = vld [vmem:[%s1 + $0x438] sm:$0xf]
  %v314 = vld [vmem:[%s1 + $0x43c] sm:$0xf]
  %v315 = vld [vmem:[%s1 + $0x440] sm:$0xf]
  %v316 = vld [vmem:[%s1 + $0x444] sm:$0xf]
  %v317 = vld [vmem:[%s1 + $0x448] sm:$0xf]
  %v318 = vld [vmem:[%s1 + $0x44c] sm:$0xf]
  %v319 = vld [vmem:[%s1 + $0x450] sm:$0xf]
  %v320 = vld [vmem:[%s1 + $0x454] sm:$0xf]
  %v321 = vld [vmem:[%s1 + $0x458] sm:$0xf]
  %v322 = vld [vmem:[%s1 + $0x45c] sm:$0xf]
  %v323 = vld [vmem:[%s1 + $0x460] sm:$0xf]
  %v324 = vld [vmem:[%s1 + $0x464] sm:$0xf]
  %v325 = vld [vmem:[%s1 + $0x468] sm:$0xf]
  %v326 = vld [vmem:[%s1 + $0x46c] sm:$0xf]
  %v327 = vld [vmem:[%s1 + $0x470] sm:$0xf]
  %v328 = vld [vmem:[%s1 + $0x474] sm:$0xf]
  %v329 = vld [vmem:[%s1 + $0x478] sm:$0xf]
  %v330 = vld [vmem:[%s1 + $0x47c] sm:$0xf]
  %v331 = vld [vmem:[%s1 + $0x480] sm:$0xf]
  %v332 = vld [vmem:[%s1 + $0x484] sm:$0xf]
  %v333 = vld [vmem:[%s1 + $0x488] sm:$0xf]
  %v334 = vld [vmem:[%s1 + $0x48c] sm:$0xf]
  %v335 = vld [vmem:[%s1 + $0x490] sm:$0xf]
  %v336 = vld [vmem:[%s1 + $0x494] sm:$0xf]
  %v337 = vld [vmem:[%s1 + $0x498] sm:$0xf]
  %v338 = vld [vmem:[%s1 + $0x49c] sm:$0xf]
  %v339 = vld [vmem:[%s1 + $0x4a0] sm:$0xf]
  %v340 = vld [vmem:[%s1 + $0x4a4] sm:$0xf]
  %v341 = vld [vmem:[%s1 + $0x4a8] sm:$0xf]
  %v342 = vld [vmem:[%s1 + $0x4ac] sm:$0xf]
  %v343 = vld [vmem:[%s1 + $0x4b0] sm:$0xf]
  %v344 = vld [vmem:[%s1 + $0x4b4] sm:$0xf]
  %v345 = vld [vmem:[%s1 + $0x4b8] sm:$0xf]
  %v346 = vld [vmem:[%s1 + $0x4bc] sm:$0xf]
  %v347 = vld [vmem:[%s1 + $0x4c0] sm:$0xf]
  %v348 = vld [vmem:[%s1 + $0x4c4] sm:$0xf]
  %v349 = vld [vmem:[%s1 + $0x4c8] sm:$0xf]
  %v350 = vld [vmem:[%s1 + $0x4cc] sm:$0xf]
  %v351 = vld [vmem:[%s1 + $0x4d0] sm:$0xf]
  %v352 = vld [vmem:[%s1 + $0x4d4] sm:$0xf]
  %v353 = vld [vmem:[%s1 + $0x4d8] sm:$0xf]
  %v354 = vld [vmem:[%s1 + $0x4dc] sm:$0xf]
  %v355 = vld [vmem:[%s1 + $0x4e0] sm:$0xf]
  %v356 = vld [vmem:[%s1 + $0x4e4] sm:$0xf]
  %v357 = vld [vmem:[%s1 + $0x4e8] sm:$0xf]
  %v358 = vld [vmem:[%s1 + $0x4ec] sm:$0xf]
  %v359 = vld [vmem:[%s1 + $0x4f0] sm:$0xf]
  %v360 = vld [vmem:[%s1 + $0x4f4] sm:$0xf]
  %v361 = vld [vmem:[%s1 + $0x4f8] sm:$0xf]
  %v362 = vld [vmem:[%s1 + $0x4fc] sm:$0xf]
  %v363 = vld [vmem:[%s1 + $0x500] sm:$0xf]
  %v364 = vld [vmem:[%s1 + $0x504] sm:$0xf]
  %v365 = vld [vmem:[%s1 + $0x508] sm:$0xf]
  %v366 = vld [vmem:[%s1 + $0x50c] sm:$0xf]
  %v367 = vld [vmem:[%s1 + $0x510] sm:$0xf]
  %v368 = vld [vmem:[%s1 + $0x514] sm:$0xf]
  %v369 = vld [vmem:[%s1 + $0x518] sm:$0xf]
  %v370 = vld [vmem:[%s1 + $0x51c] sm:$0xf]
  %v371 = vld [vmem:[%s1 + $0x520] sm:$0xf]
  %v372 = vld [vmem:[%s1 + $0x524] sm:$0xf]
  %v373 = vld [vmem:[%s1 + $0x528] sm:$0xf]
  %v374 = vld [vmem:[%s1 + $0x52c] sm:$0xf]
  %v375 = vld [vmem:[%s1 + $0x530] sm:$0xf]
  %v376 = vld [vmem:[%s1 + $0x534] sm:$0xf]
  %v377 = vld [vmem:[%s1 + $0x538] sm:$0xf]
  %v378 = vld [vmem:[%s1 + $0x53c] sm:$0xf]
  %v379 = vld [vmem:[%s1 + $0x540] sm:$0xf]
  %v380 = vld [vmem:[%s1 + $0x544] sm:$0xf]
  %v381 = vld [vmem:[%s1 + $0x548] sm:$0xf]
  %v382 = vld [vmem:[%s1 + $0x54c] sm:$0xf]
  %v383 = vld [vmem:[%s1 + $0x550] sm:$0xf]
  %v384 = vld [vmem:[%s1 + $0x554] sm:$0xf]
  %v385 = vld [vmem:[%s1 + $0x558] sm:$0xf]
  %v386 = vld [vmem:[%s1 + $0x55c] sm:$0xf]
  %v387 = vld [vmem:[%s1 + $0x560] sm:$0xf]
  %v388 = vld [vmem:[%s1 + $0x564] sm:$0xf]
  %v389 = vld [vmem:[%s1 + $0x568] sm:$0xf]
  %v390 = vld [vmem:[%s1 + $0x56c] sm:$0xf]
  %v391 = vld [vmem:[%s1 + $0x570] sm:$0xf]
  %v392 = vld [vmem:[%s1 + $0x574] sm:$0xf]
  %v393 = vld [vmem:[%s1 + $0x578] sm:$0xf]
  %v394 = vld [vmem:[%s1 + $0x57c] sm:$0xf]
  %v395 = vld [vmem:[%s1 + $0x580] sm:$0xf]
  %v396 = vld [vmem:[%s1 + $0x584] sm:$0xf]
  %v397 = vld [vmem:[%s1 + $0x588] sm:$0xf]
  %v398 = vld [vmem:[%s1 + $0x58c] sm:$0xf]
  %v399 = vld [vmem:[%s1 + $0x590] sm:$0xf]
  %v400 = vld [vmem:[%s1 + $0x594] sm:$0xf]
  %v401 = vld [vmem:[%s1 + $0x598] sm:$0xf]
  %v402 = vld [vmem:[%s1 + $0x59c] sm:$0xf]
  %v403 = vld [vmem:[%s1 + $0x5a0] sm:$0xf]
  %v404 = vld [vmem:[%s1 + $0x5a4] sm:$0xf]
  %v405 = vld [vmem:[%s1 + $0x5a8] sm:$0xf]
  %v406 = vld [vmem:[%s1 + $0x5ac] sm:$0xf]
  %v407 = vld [vmem:[%s1 + $0x5b0] sm:$0xf]
  %v408 = vld [vmem:[%s1 + $0x5b4] sm:$0xf]
  %v409 = vld [vmem:[%s1 + $0x5b8] sm:$0xf]
  %v410 = vld [vmem:[%s1 + $0x5bc] sm:$0xf]
  %v411 = vld [vmem:[%s1 + $0x5c0] sm:$0xf]
  %v412 = vld [vmem:[%s1 + $0x5c4] sm:$0xf]
  %v413 = vld [vmem:[%s1 + $0x5c8] sm:$0xf]
  %v414 = vld [vmem:[%s1 + $0x5cc] sm:$0xf]
  %v415 = vld [vmem:[%s1 + $0x5d0] sm:$0xf]
  %v416 = vld [vmem:[%s1 + $0x5d4] sm:$0xf]
  %v417 = vld [vmem:[%s1 + $0x5d8] sm:$0xf]
  %v418 = vld [vmem:[%s1 + $0x5dc] sm:$0xf]
  %v419 = vld [vmem:[%s1 + $0x5e0] sm:$0xf]
  %v420 = vld [vmem:[%s1 + $0x5e4] sm:$0xf]
  %v421 = vld [vmem:[%s1 + $0x5e8] sm:$0xf]
  %v422 = vld [vmem:[%s1 + $0x5ec] sm:$0xf]
  %v423 = vld [vmem:[%s1 + $0x5f0] sm:$0xf]
  %v424 = vld [vmem:[%s1 + $0x5f4] sm:$0xf]
  %v425 = vld [vmem:[%s1 + $0x5f8] sm:$0xf]
  %v426 = vld [vmem:[%s1 + $0x5fc] sm:$0xf]
  %v427 = vld [vmem:[%s1 + $0x600] sm:$0xf]
  %v428 = vld [vmem:[%s1 + $0x604] sm:$0xf]
  %v429 = vld [vmem:[%s1 + $0x608] sm:$0xf]
  %v430 = vld [vmem:[%s1 + $0x60c] sm:$0xf]
  %v431 = vld [vmem:[%s1 + $0x610] sm:$0xf]
  %v432 = vld [vmem:[%s1 + $0x614] sm:$0xf]
  %v433 = vld [vmem:[%s1 + $0x618] sm:$0xf]
  %v434 = vld [vmem:[%s1 + $0x61c] sm:$0xf]
  %v435 = vld [vmem:[%s1 + $0x620] sm:$0xf]
  %v436 = vld [vmem:[%s1 + $0x624] sm:$0xf]
  %v437 = vld [vmem:[%s1 + $0x628] sm:$0xf]
  %v438 = vld [vmem:[%s1 + $0x62c] sm:$0xf]
  %v439 = vld [vmem:[%s1 + $0x630] sm:$0xf]
  %v440 = vld [vmem:[%s1 + $0x634] sm:$0xf]
  %v441 = vld [vmem:[%s1 + $0x638] sm:$0xf]
  %v442 = vld [vmem:[%s1 + $0x63c] sm:$0xf]
  %v443 = vld [vmem:[%s1 + $0x640] sm:$0xf]
  %v444 = vld [vmem:[%s1 + $0x644] sm:$0xf]
  %v445 = vld [vmem:[%s1 + $0x648] sm:$0xf]
  %v446 = vld [vmem:[%s1 + $0x64c] sm:$0xf]
  %v447 = vld [vmem:[%s1 + $0x650] sm:$0xf]
  %v448 = vld [vmem:[%s1 + $0x654] sm:$0xf]
  %v449 = vld [vmem:[%s1 + $0x658] sm:$0xf]
  %v450 = vld [vmem:[%s1 + $0x65c] sm:$0xf]
  %v451 = vld [vmem:[%s1 + $0x660] sm:$0xf]
  %v452 = vld [vmem:[%s1 + $0x664] sm:$0xf]
  %v453 = vld [vmem:[%s1 + $0x668] sm:$0xf]
  %v454 = vld [vmem:[%s1 + $0x66c] sm:$0xf]
  %v455 = vld [vmem:[%s1 + $0x670] sm:$0xf]
  %v456 = vld [vmem:[%s1 + $0x674] sm:$0xf]
  %v457 = vld [vmem:[%s1 + $0x678] sm:$0xf]
  %v458 = vld [vmem:[%s1 + $0x67c] sm:$0xf]
  %v459 = vld [vmem:[%s1 + $0x680] sm:$0xf]
  %v460 = vld [vmem:[%s1 + $0x684] sm:$0xf]
  %v461 = vld [vmem:[%s1 + $0x688] sm:$0xf]
  %v462 = vld [vmem:[%s1 + $0x68c] sm:$0xf]
  %v463 = vld [vmem:[%s1 + $0x690] sm:$0xf]
  %v464 = vld [vmem:[%s1 + $0x694] sm:$0xf]
  %v465 = vld [vmem:[%s1 + $0x698] sm:$0xf]
  %v466 = vld [vmem:[%s1 + $0x69c] sm:$0xf]
  %v467 = vld [vmem:[%s1 + $0x6a0] sm:$0xf]
  %v468 = vld [vmem:[%s1 + $0x6a4] sm:$0xf]
  %v469 = vld [vmem:[%s1 + $0x6a8] sm:$0xf]
  %v470 = vld [vmem:[%s1 + $0x6ac] sm:$0xf]
  %v471 = vld [vmem:[%s1 + $0x6b0] sm:$0xf]
  %v472 = vld [vmem:[%s1 + $0x6b4] sm:$0xf]
  %v473 = vld [vmem:[%s1 + $0x6b8] sm:$0xf]
  %v474 = vld [vmem:[%s1 + $0x6bc] sm:$0xf]
  %v475 = vld [vmem:[%s2] sm:$0x1]
  %v477 = vlaneseq
  %v478 = vshrl.u32 %v477, 7
  %v479 = vsub.s32 0, %v478
  %v480 = vrot.slane %v475, %v479
  %v510 = vunpack.c.l.b16 %v15
  %v511 = vunpack.c.h.b16 %v15
  %v512 = vunpack.c.l.b16 %v16
  %v513 = vunpack.c.h.b16 %v16
  %v514 = vunpack.c.l.b16 %v17
  %v515 = vunpack.c.h.b16 %v17
  %v516 = vunpack.c.l.b16 %v18
  %v517 = vunpack.c.h.b16 %v18
  %v518 = vunpack.c.l.b16 %v19
  %v519 = vunpack.c.h.b16 %v19
  %v520 = vunpack.c.l.b16 %v20
  %v521 = vunpack.c.h.b16 %v20
  %v522 = vunpack.c.l.b16 %v21
  %v523 = vunpack.c.h.b16 %v21
  %v524 = vunpack.c.l.b16 %v22
  %v525 = vunpack.c.h.b16 %v22
  %v526 = vunpack.c.l.b16 %v23
  %v527 = vunpack.c.h.b16 %v23
  %v528 = vunpack.c.l.b16 %v24
  %v529 = vunpack.c.h.b16 %v24
  %v530 = vunpack.c.l.b16 %v25
  %v531 = vunpack.c.h.b16 %v25
  %v532 = vunpack.c.l.b16 %v26
  %v533 = vunpack.c.h.b16 %v26
  %v534 = vunpack.c.l.b16 %v27
  %v535 = vunpack.c.h.b16 %v27
  %v536 = vunpack.c.l.b16 %v28
  %v537 = vunpack.c.l.b16 %v29
  %v538 = vunpack.c.h.b16 %v29
  %v539 = vunpack.c.l.b16 %v30
  %v540 = vunpack.c.h.b16 %v30
  %v541 = vunpack.c.l.b16 %v31
  %v542 = vunpack.c.h.b16 %v31
  %v543 = vunpack.c.l.b16 %v32
  %v544 = vunpack.c.h.b16 %v32
  %v545 = vunpack.c.l.b16 %v33
  %v546 = vunpack.c.h.b16 %v33
  %v547 = vunpack.c.l.b16 %v34
  %v548 = vunpack.c.h.b16 %v34
  %v549 = vunpack.c.l.b16 %v35
  %v550 = vunpack.c.h.b16 %v35
  %v551 = vunpack.c.l.b16 %v36
  %v552 = vunpack.c.h.b16 %v36
  %v553 = vunpack.c.l.b16 %v37
  %v554 = vunpack.c.h.b16 %v37
  %v555 = vunpack.c.l.b16 %v38
  %v556 = vunpack.c.h.b16 %v38
  %v557 = vunpack.c.l.b16 %v39
  %v558 = vunpack.c.h.b16 %v39
  %v559 = vunpack.c.l.b16 %v40
  %v560 = vunpack.c.h.b16 %v40
  %v561 = vunpack.c.l.b16 %v41
  %v562 = vunpack.c.h.b16 %v41
  %v563 = vunpack.c.l.b16 %v42
  %v564 = vpack.c.b16 %v537, %v510
  %v565 = vpack.c.b16 %v538, %v511
  %v566 = vpack.c.b16 %v539, %v512
  %v567 = vpack.c.b16 %v540, %v513
  %v568 = vpack.c.b16 %v541, %v514
  %v569 = vpack.c.b16 %v542, %v515
  %v570 = vpack.c.b16 %v543, %v516
  %v571 = vpack.c.b16 %v544, %v517
  %v572 = vpack.c.b16 %v545, %v518
  %v573 = vpack.c.b16 %v546, %v519
  %v574 = vpack.c.b16 %v547, %v520
  %v575 = vpack.c.b16 %v548, %v521
  %v576 = vpack.c.b16 %v549, %v522
  %v577 = vpack.c.b16 %v550, %v523
  %v578 = vpack.c.b16 %v551, %v524
  %v579 = vpack.c.b16 %v552, %v525
  %v580 = vpack.c.b16 %v553, %v526
  %v581 = vpack.c.b16 %v554, %v527
  %v582 = vpack.c.b16 %v555, %v528
  %v583 = vpack.c.b16 %v556, %v529
  %v584 = vpack.c.b16 %v557, %v530
  %v585 = vpack.c.b16 %v558, %v531
  %v586 = vpack.c.b16 %v559, %v532
  %v587 = vpack.c.b16 %v560, %v533
  %v588 = vpack.c.b16 %v561, %v534
  %v589 = vpack.c.b16 %v562, %v535
  %v590 = vpack.c.b16 %v563, %v536
  %v1050 = vunpack.c.l.b16 %v43
  %v1051 = vunpack.c.l.b16 %v44
  %v1052 = vunpack.c.l.b16 %v45
  %v1053 = vunpack.c.l.b16 %v46
  %v1054 = vunpack.c.l.b16 %v47
  %v1055 = vunpack.c.l.b16 %v48
  %v1056 = vunpack.c.l.b16 %v49
  %v1057 = vunpack.c.l.b16 %v50
  %v1058 = vunpack.c.l.b16 %v51
  %v1059 = vunpack.c.l.b16 %v52
  %v1060 = vunpack.c.l.b16 %v53
  %v1061 = vunpack.c.l.b16 %v54
  %v1062 = vunpack.c.l.b16 %v55
  %v1063 = vunpack.c.l.b16 %v56
  %v1064 = vunpack.c.l.b16 %v57
  %v1065 = vunpack.c.l.b16 %v58
  %v1066 = vunpack.c.l.b16 %v59
  %v1067 = vunpack.c.l.b16 %v60
  %v1068 = vunpack.c.l.b16 %v61
  %v1069 = vunpack.c.l.b16 %v62
  %v1070 = vunpack.c.l.b16 %v63
  %v1071 = vunpack.c.l.b16 %v64
  %v1072 = vunpack.c.l.b16 %v65
  %v1073 = vunpack.c.l.b16 %v66
  %v1074 = vunpack.c.l.b16 %v67
  %v1075 = vunpack.c.l.b16 %v68
  %v1076 = vunpack.c.l.b16 %v69
  %v1077 = vunpack.c.l.b16 %v70
  %v1078 = vunpack.c.l.b16 %v71
  %v1079 = vunpack.c.l.b16 %v72
  %v1080 = vunpack.c.l.b16 %v73
  %v1081 = vunpack.c.l.b16 %v74
  %v1082 = vunpack.c.l.b16 %v75
  %v1083 = vunpack.c.l.b16 %v76
  %v1084 = vunpack.c.l.b16 %v77
  %v1085 = vunpack.c.l.b16 %v78
  %v1086 = vunpack.c.l.b16 %v79
  %v1087 = vunpack.c.l.b16 %v80
  %v1088 = vunpack.c.l.b16 %v81
  %v1089 = vunpack.c.l.b16 %v82
  %v1090 = vunpack.c.l.b16 %v83
  %v1091 = vunpack.c.l.b16 %v84
  %v1092 = vunpack.c.l.b16 %v85
  %v1093 = vunpack.c.l.b16 %v86
  %v1094 = vunpack.c.l.b16 %v87
  %v1095 = vunpack.c.l.b16 %v88
  %v1096 = vunpack.c.l.b16 %v89
  %v1097 = vunpack.c.l.b16 %v90
  %v1098 = vunpack.c.l.b16 %v91
  %v1099 = vunpack.c.l.b16 %v92
  %v1100 = vunpack.c.l.b16 %v93
  %v1101 = vunpack.c.l.b16 %v94
  %v1102 = vunpack.c.l.b16 %v95
  %v1103 = vunpack.c.l.b16 %v96
  %v1104 = vunpack.c.l.b16 %v97
  %v1105 = vunpack.c.l.b16 %v98
  %v1106 = vunpack.c.l.b16 %v99
  %v1107 = vunpack.c.l.b16 %v100
  %v1108 = vunpack.c.l.b16 %v101
  %v1109 = vunpack.c.l.b16 %v102
  %v1110 = vunpack.c.l.b16 %v103
  %v1111 = vunpack.c.l.b16 %v104
  %v1112 = vunpack.c.l.b16 %v105
  %v1113 = vunpack.c.l.b16 %v106
  %v1114 = vunpack.c.l.b16 %v107
  %v1115 = vunpack.c.l.b16 %v108
  %v1116 = vunpack.c.l.b16 %v109
  %v1117 = vunpack.c.l.b16 %v110
  %v1118 = vunpack.c.l.b16 %v111
  %v1119 = vunpack.c.l.b16 %v112
  %v1120 = vunpack.c.l.b16 %v113
  %v1121 = vunpack.c.l.b16 %v114
  %v1122 = vunpack.c.l.b16 %v115
  %v1123 = vunpack.c.l.b16 %v116
  %v1124 = vunpack.c.l.b16 %v117
  %v1125 = vunpack.c.l.b16 %v118
  %v1126 = vunpack.c.l.b16 %v119
  %v1127 = vunpack.c.l.b16 %v120
  %v1128 = vunpack.c.l.b16 %v121
  %v1129 = vunpack.c.l.b16 %v122
  %v1130 = vunpack.c.l.b16 %v123
  %v1131 = vunpack.c.l.b16 %v124
  %v1132 = vunpack.c.l.b16 %v125
  %v1133 = vunpack.c.l.b16 %v126
  %v1134 = vunpack.c.l.b16 %v127
  %v1135 = vunpack.c.l.b16 %v128
  %v1136 = vunpack.c.l.b16 %v129
  %v1137 = vunpack.c.l.b16 %v130
  %v1138 = vunpack.c.l.b16 %v131
  %v1139 = vunpack.c.l.b16 %v132
  %v1140 = vunpack.c.l.b16 %v133
  %v1141 = vunpack.c.l.b16 %v134
  %v1142 = vunpack.c.l.b16 %v135
  %v1143 = vunpack.c.l.b16 %v136
  %v1144 = vunpack.c.l.b16 %v137
  %v1145 = vunpack.c.l.b16 %v138
  %v1146 = vunpack.c.l.b16 %v139
  %v1147 = vunpack.c.l.b16 %v140
  %v1148 = vunpack.c.l.b16 %v141
  %v1149 = vunpack.c.l.b16 %v142
  %v1150 = vunpack.c.l.b16 %v143
  %v1151 = vunpack.c.l.b16 %v144
  %v1152 = vunpack.c.l.b16 %v145
  %v1153 = vunpack.c.l.b16 %v146
  %v1154 = vunpack.c.l.b16 %v147
  %v1155 = vunpack.c.l.b16 %v148
  %v1156 = vunpack.c.l.b16 %v149
  %v1157 = vunpack.c.l.b16 %v150
  %v1158 = vunpack.c.l.b16 %v151
  %v1159 = vunpack.c.l.b16 %v152
  %v1160 = vunpack.c.l.b16 %v153
  %v1161 = vunpack.c.l.b16 %v154
  %v1162 = vunpack.c.l.b16 %v155
  %v1163 = vunpack.c.l.b16 %v156
  %v1164 = vunpack.c.l.b16 %v157
  %v1165 = vunpack.c.l.b16 %v158
  %v1166 = vunpack.c.l.b16 %v159
  %v1167 = vunpack.c.l.b16 %v160
  %v1168 = vunpack.c.l.b16 %v161
  %v1169 = vunpack.c.l.b16 %v162
  %v1170 = vunpack.c.l.b16 %v163
  %v1171 = vunpack.c.l.b16 %v164
  %v1172 = vunpack.c.l.b16 %v165
  %v1173 = vunpack.c.l.b16 %v166
  %v1174 = vunpack.c.l.b16 %v167
  %v1175 = vunpack.c.l.b16 %v168
  %v1176 = vunpack.c.l.b16 %v169
  %v1177 = vunpack.c.l.b16 %v170
  %v1178 = vunpack.c.l.b16 %v171
  %v1179 = vunpack.c.l.b16 %v172
  %v1180 = vunpack.c.l.b16 %v173
  %v1181 = vunpack.c.l.b16 %v174
  %v1182 = vunpack.c.l.b16 %v175
  %v1183 = vunpack.c.l.b16 %v176
  %v1184 = vunpack.c.l.b16 %v177
  %v1185 = vunpack.c.l.b16 %v178
  %v1186 = vunpack.c.l.b16 %v179
  %v1187 = vunpack.c.l.b16 %v180
  %v1188 = vunpack.c.l.b16 %v181
  %v1189 = vunpack.c.l.b16 %v182
  %v1190 = vunpack.c.l.b16 %v183
  %v1191 = vunpack.c.l.b16 %v184
  %v1192 = vunpack.c.l.b16 %v185
  %v1193 = vunpack.c.l.b16 %v186
  %v1194 = vunpack.c.l.b16 %v187
  %v1195 = vunpack.c.l.b16 %v188
  %v1196 = vunpack.c.l.b16 %v189
  %v1197 = vunpack.c.l.b16 %v190
  %v1198 = vunpack.c.l.b16 %v191
  %v1199 = vunpack.c.l.b16 %v192
  %v1200 = vunpack.c.l.b16 %v193
  %v1201 = vunpack.c.l.b16 %v194
  %v1202 = vunpack.c.l.b16 %v195
  %v1203 = vunpack.c.l.b16 %v196
  %v1204 = vunpack.c.l.b16 %v197
  %v1205 = vunpack.c.l.b16 %v198
  %v1206 = vunpack.c.l.b16 %v199
  %v1207 = vunpack.c.l.b16 %v200
  %v1208 = vunpack.c.l.b16 %v201
  %v1209 = vunpack.c.l.b16 %v202
  %v1210 = vunpack.c.l.b16 %v203
  %v1211 = vunpack.c.l.b16 %v204
  %v1212 = vunpack.c.l.b16 %v205
  %v1213 = vunpack.c.l.b16 %v206
  %v1214 = vunpack.c.l.b16 %v207
  %v1215 = vunpack.c.l.b16 %v208
  %v1216 = vunpack.c.l.b16 %v209
  %v1217 = vunpack.c.l.b16 %v210
  %v1218 = vunpack.c.l.b16 %v211
  %v1219 = vunpack.c.l.b16 %v212
  %v1220 = vunpack.c.l.b16 %v213
  %v1221 = vunpack.c.l.b16 %v214
  %v1222 = vunpack.c.l.b16 %v215
  %v1223 = vunpack.c.l.b16 %v216
  %v1224 = vunpack.c.l.b16 %v217
  %v1225 = vunpack.c.l.b16 %v218
  %v1226 = vunpack.c.l.b16 %v219
  %v1227 = vunpack.c.l.b16 %v220
  %v1228 = vunpack.c.l.b16 %v221
  %v1229 = vunpack.c.l.b16 %v222
  %v1230 = vunpack.c.l.b16 %v223
  %v1231 = vunpack.c.l.b16 %v224
  %v1232 = vunpack.c.l.b16 %v225
  %v1233 = vunpack.c.l.b16 %v226
  %v1234 = vunpack.c.l.b16 %v227
  %v1235 = vunpack.c.l.b16 %v228
  %v1236 = vunpack.c.l.b16 %v229
  %v1237 = vunpack.c.l.b16 %v230
  %v1238 = vunpack.c.l.b16 %v231
  %v1239 = vunpack.c.l.b16 %v232
  %v1240 = vunpack.c.l.b16 %v233
  %v1241 = vunpack.c.l.b16 %v234
  %v1242 = vunpack.c.l.b16 %v235
  %v1243 = vunpack.c.l.b16 %v236
  %v1244 = vunpack.c.l.b16 %v237
  %v1245 = vunpack.c.l.b16 %v238
  %v1246 = vunpack.c.l.b16 %v239
  %v1247 = vunpack.c.l.b16 %v240
  %v1248 = vunpack.c.l.b16 %v241
  %v1249 = vunpack.c.l.b16 %v242
  %v1250 = vunpack.c.l.b16 %v243
  %v1251 = vunpack.c.l.b16 %v244
  %v1252 = vunpack.c.l.b16 %v245
  %v1253 = vunpack.c.l.b16 %v246
  %v1254 = vunpack.c.l.b16 %v247
  %v1255 = vunpack.c.l.b16 %v248
  %v1256 = vunpack.c.l.b16 %v249
  %v1257 = vunpack.c.l.b16 %v250
  %v1258 = vunpack.c.l.b16 %v251
  %v1259 = vunpack.c.l.b16 %v252
  %v1260 = vunpack.c.l.b16 %v253
  %v1261 = vunpack.c.l.b16 %v254
  %v1262 = vunpack.c.l.b16 %v255
  %v1263 = vunpack.c.l.b16 %v256
  %v1264 = vunpack.c.l.b16 %v257
  %v1265 = vunpack.c.l.b16 %v258
  %v1266 = vunpack.c.l.b16 %v259
  %v1267 = vunpack.c.l.b16 %v260
  %v1268 = vunpack.c.l.b16 %v261
  %v1269 = vunpack.c.l.b16 %v262
  %v1270 = vunpack.c.l.b16 %v263
  %v1271 = vunpack.c.l.b16 %v264
  %v1272 = vunpack.c.l.b16 %v265
  %v1273 = vunpack.c.l.b16 %v266
  %v1274 = vunpack.c.l.b16 %v267
  %v1275 = vunpack.c.l.b16 %v268
  %v1276 = vunpack.c.l.b16 %v269
  %v1277 = vunpack.c.l.b16 %v270
  %v1278 = vunpack.c.l.b16 %v271
  %v1279 = vunpack.c.l.b16 %v272
  %v1280 = vunpack.c.l.b16 %v273
  %v1281 = vunpack.c.l.b16 %v274
  %v1282 = vunpack.c.l.b16 %v275
  %v1283 = vunpack.c.l.b16 %v276
  %v1284 = vunpack.c.l.b16 %v277
  %v1285 = vunpack.c.l.b16 %v278
  %v1286 = vunpack.c.l.b16 %v279
  %v1287 = vunpack.c.l.b16 %v280
  %v1288 = vunpack.c.l.b16 %v281
  %v1289 = vunpack.c.l.b16 %v282
  %v1290 = vunpack.c.l.b16 %v283
  %v1291 = vunpack.c.l.b16 %v284
  %v1292 = vunpack.c.l.b16 %v285
  %v1293 = vunpack.c.l.b16 %v286
  %v1294 = vunpack.c.l.b16 %v287
  %v1295 = vunpack.c.l.b16 %v288
  %v1296 = vunpack.c.l.b16 %v289
  %v1297 = vunpack.c.l.b16 %v290
  %v1298 = vunpack.c.l.b16 %v291
  %v1299 = vunpack.c.l.b16 %v292
  %v1300 = vunpack.c.l.b16 %v293
  %v1301 = vunpack.c.l.b16 %v294
  %v1302 = vunpack.c.l.b16 %v295
  %v1303 = vunpack.c.l.b16 %v296
  %v1304 = vunpack.c.l.b16 %v297
  %v1305 = vunpack.c.l.b16 %v298
  %v1306 = vunpack.c.l.b16 %v299
  %v1307 = vunpack.c.l.b16 %v300
  %v1308 = vunpack.c.l.b16 %v301
  %v1309 = vunpack.c.l.b16 %v302
  %v1310 = vunpack.c.l.b16 %v303
  %v1311 = vunpack.c.l.b16 %v304
  %v1312 = vunpack.c.l.b16 %v305
  %v1313 = vunpack.c.l.b16 %v306
  %v1314 = vunpack.c.l.b16 %v307
  %v1315 = vunpack.c.l.b16 %v308
  %v1316 = vunpack.c.l.b16 %v309
  %v1317 = vunpack.c.l.b16 %v310
  %v1318 = vunpack.c.l.b16 %v311
  %v1319 = vunpack.c.l.b16 %v312
  %v1320 = vunpack.c.l.b16 %v313
  %v1321 = vunpack.c.l.b16 %v314
  %v1322 = vunpack.c.l.b16 %v315
  %v1323 = vunpack.c.l.b16 %v316
  %v1324 = vunpack.c.l.b16 %v317
  %v1325 = vunpack.c.l.b16 %v318
  %v1326 = vunpack.c.l.b16 %v319
  %v1327 = vunpack.c.l.b16 %v320
  %v1328 = vunpack.c.l.b16 %v321
  %v1329 = vunpack.c.l.b16 %v322
  %v1330 = vunpack.c.l.b16 %v323
  %v1331 = vunpack.c.l.b16 %v324
  %v1332 = vunpack.c.l.b16 %v325
  %v1333 = vunpack.c.l.b16 %v326
  %v1334 = vunpack.c.l.b16 %v327
  %v1335 = vunpack.c.l.b16 %v328
  %v1336 = vunpack.c.l.b16 %v329
  %v1337 = vunpack.c.l.b16 %v330
  %v1338 = vunpack.c.l.b16 %v331
  %v1339 = vunpack.c.l.b16 %v332
  %v1340 = vunpack.c.l.b16 %v333
  %v1341 = vunpack.c.l.b16 %v334
  %v1342 = vunpack.c.l.b16 %v335
  %v1343 = vunpack.c.l.b16 %v336
  %v1344 = vunpack.c.l.b16 %v337
  %v1345 = vunpack.c.l.b16 %v338
  %v1346 = vunpack.c.l.b16 %v339
  %v1347 = vunpack.c.l.b16 %v340
  %v1348 = vunpack.c.l.b16 %v341
  %v1349 = vunpack.c.l.b16 %v342
  %v1350 = vunpack.c.l.b16 %v343
  %v1351 = vunpack.c.l.b16 %v344
  %v1352 = vunpack.c.l.b16 %v345
  %v1353 = vunpack.c.l.b16 %v346
  %v1354 = vunpack.c.l.b16 %v347
  %v1355 = vunpack.c.l.b16 %v348
  %v1356 = vunpack.c.l.b16 %v349
  %v1357 = vunpack.c.l.b16 %v350
  %v1358 = vunpack.c.l.b16 %v351
  %v1359 = vunpack.c.l.b16 %v352
  %v1360 = vunpack.c.l.b16 %v353
  %v1361 = vunpack.c.l.b16 %v354
  %v1362 = vunpack.c.l.b16 %v355
  %v1363 = vunpack.c.l.b16 %v356
  %v1364 = vunpack.c.l.b16 %v357
  %v1365 = vunpack.c.l.b16 %v358
  %v1366 = vunpack.c.l.b16 %v359
  %v1367 = vunpack.c.l.b16 %v360
  %v1368 = vunpack.c.l.b16 %v361
  %v1369 = vunpack.c.l.b16 %v362
  %v1370 = vunpack.c.l.b16 %v363
  %v1371 = vunpack.c.l.b16 %v364
  %v1372 = vunpack.c.l.b16 %v365
  %v1373 = vunpack.c.l.b16 %v366
  %v1374 = vunpack.c.l.b16 %v367
  %v1375 = vunpack.c.l.b16 %v368
  %v1376 = vunpack.c.l.b16 %v369
  %v1377 = vunpack.c.l.b16 %v370
  %v1378 = vunpack.c.l.b16 %v371
  %v1379 = vunpack.c.l.b16 %v372
  %v1380 = vunpack.c.l.b16 %v373
  %v1381 = vunpack.c.l.b16 %v374
  %v1382 = vunpack.c.l.b16 %v375
  %v1383 = vunpack.c.l.b16 %v376
  %v1384 = vunpack.c.l.b16 %v377
  %v1385 = vunpack.c.l.b16 %v378
  %v1386 = vunpack.c.l.b16 %v379
  %v1387 = vunpack.c.l.b16 %v380
  %v1388 = vunpack.c.l.b16 %v381
  %v1389 = vunpack.c.l.b16 %v382
  %v1390 = vunpack.c.l.b16 %v383
  %v1391 = vunpack.c.l.b16 %v384
  %v1392 = vunpack.c.l.b16 %v385
  %v1393 = vunpack.c.l.b16 %v386
  %v1394 = vunpack.c.l.b16 %v387
  %v1395 = vunpack.c.l.b16 %v388
  %v1396 = vunpack.c.l.b16 %v389
  %v1397 = vunpack.c.l.b16 %v390
  %v1398 = vunpack.c.l.b16 %v391
  %v1399 = vunpack.c.l.b16 %v392
  %v1400 = vunpack.c.l.b16 %v393
  %v1401 = vunpack.c.l.b16 %v394
  %v1402 = vunpack.c.l.b16 %v395
  %v1403 = vunpack.c.l.b16 %v396
  %v1404 = vunpack.c.l.b16 %v397
  %v1405 = vunpack.c.l.b16 %v398
  %v1406 = vunpack.c.l.b16 %v399
  %v1407 = vunpack.c.l.b16 %v400
  %v1408 = vunpack.c.l.b16 %v401
  %v1409 = vunpack.c.l.b16 %v402
  %v1410 = vunpack.c.l.b16 %v403
  %v1411 = vunpack.c.l.b16 %v404
  %v1412 = vunpack.c.l.b16 %v405
  %v1413 = vunpack.c.l.b16 %v406
  %v1414 = vunpack.c.l.b16 %v407
  %v1415 = vunpack.c.l.b16 %v408
  %v1416 = vunpack.c.l.b16 %v409
  %v1417 = vunpack.c.l.b16 %v410
  %v1418 = vunpack.c.l.b16 %v411
  %v1419 = vunpack.c.l.b16 %v412
  %v1420 = vunpack.c.l.b16 %v413
  %v1421 = vunpack.c.l.b16 %v414
  %v1422 = vunpack.c.l.b16 %v415
  %v1423 = vunpack.c.l.b16 %v416
  %v1424 = vunpack.c.l.b16 %v417
  %v1425 = vunpack.c.l.b16 %v418
  %v1426 = vunpack.c.l.b16 %v419
  %v1427 = vunpack.c.l.b16 %v420
  %v1428 = vunpack.c.l.b16 %v421
  %v1429 = vunpack.c.l.b16 %v422
  %v1430 = vunpack.c.l.b16 %v423
  %v1431 = vunpack.c.l.b16 %v424
  %v1432 = vunpack.c.l.b16 %v425
  %v1433 = vunpack.c.l.b16 %v426
  %v1434 = vunpack.c.l.b16 %v427
  %v1435 = vunpack.c.l.b16 %v428
  %v1436 = vunpack.c.l.b16 %v429
  %v1437 = vunpack.c.l.b16 %v430
  %v1438 = vunpack.c.l.b16 %v431
  %v1439 = vunpack.c.l.b16 %v432
  %v1440 = vunpack.c.l.b16 %v433
  %v1441 = vunpack.c.l.b16 %v434
  %v1442 = vunpack.c.l.b16 %v435
  %v1443 = vunpack.c.l.b16 %v436
  %v1444 = vunpack.c.l.b16 %v437
  %v1445 = vunpack.c.l.b16 %v438
  %v1446 = vunpack.c.l.b16 %v439
  %v1447 = vunpack.c.l.b16 %v440
  %v1448 = vunpack.c.l.b16 %v441
  %v1449 = vunpack.c.l.b16 %v442
  %v1450 = vunpack.c.l.b16 %v443
  %v1451 = vunpack.c.l.b16 %v444
  %v1452 = vunpack.c.l.b16 %v445
  %v1453 = vunpack.c.l.b16 %v446
  %v1454 = vunpack.c.l.b16 %v447
  %v1455 = vunpack.c.l.b16 %v448
  %v1456 = vunpack.c.l.b16 %v449
  %v1457 = vunpack.c.l.b16 %v450
  %v1458 = vunpack.c.l.b16 %v451
  %v1459 = vunpack.c.l.b16 %v452
  %v1460 = vunpack.c.l.b16 %v453
  %v1461 = vunpack.c.l.b16 %v454
  %v1462 = vunpack.c.l.b16 %v455
  %v1463 = vunpack.c.l.b16 %v456
  %v1464 = vunpack.c.l.b16 %v457
  %v1465 = vunpack.c.l.b16 %v458
  %v1466 = vunpack.c.l.b16 %v459
  %v1467 = vunpack.c.l.b16 %v460
  %v1468 = vunpack.c.l.b16 %v461
  %v1469 = vunpack.c.l.b16 %v462
  %v1470 = vunpack.c.l.b16 %v463
  %v1471 = vunpack.c.l.b16 %v464
  %v1472 = vunpack.c.l.b16 %v465
  %v1473 = vunpack.c.l.b16 %v466
  %v1474 = vunpack.c.l.b16 %v467
  %v1475 = vunpack.c.l.b16 %v468
  %v1476 = vunpack.c.l.b16 %v469
  %v1477 = vunpack.c.l.b16 %v470
  %v1478 = vunpack.c.l.b16 %v471
  %v1479 = vunpack.c.l.b16 %v472
  %v1480 = vunpack.c.l.b16 %v473
  %v1481 = vunpack.c.l.b16 %v474
  %v1482 = vpack.c.b16 %v1051, %v1050
  %v1483 = vpack.c.b16 %v1053, %v1052
  %v1484 = vpack.c.b16 %v1055, %v1054
  %v1485 = vpack.c.b16 %v1057, %v1056
  %v1486 = vpack.c.b16 %v1059, %v1058
  %v1487 = vpack.c.b16 %v1061, %v1060
  %v1488 = vpack.c.b16 %v1063, %v1062
  %v1489 = vpack.c.b16 %v1065, %v1064
  %v1490 = vpack.c.b16 %v1067, %v1066
  %v1491 = vpack.c.b16 %v1069, %v1068
  %v1492 = vpack.c.b16 %v1071, %v1070
  %v1493 = vpack.c.b16 %v1073, %v1072
  %v1494 = vpack.c.b16 %v1075, %v1074
  %v1495 = vpack.c.b16 %v1077, %v1076
  %v1496 = vpack.c.b16 %v1079, %v1078
  %v1497 = vpack.c.b16 %v1081, %v1080
  %v1498 = vpack.c.b16 %v1083, %v1082
  %v1499 = vpack.c.b16 %v1085, %v1084
  %v1500 = vpack.c.b16 %v1087, %v1086
  %v1501 = vpack.c.b16 %v1089, %v1088
  %v1502 = vpack.c.b16 %v1091, %v1090
  %v1503 = vpack.c.b16 %v1093, %v1092
  %v1504 = vpack.c.b16 %v1095, %v1094
  %v1505 = vpack.c.b16 %v1097, %v1096
  %v1506 = vpack.c.b16 %v1099, %v1098
  %v1507 = vpack.c.b16 %v1101, %v1100
  %v1508 = vpack.c.b16 %v1103, %v1102
  %v1509 = vpack.c.b16 %v1105, %v1104
  %v1510 = vpack.c.b16 %v1107, %v1106
  %v1511 = vpack.c.b16 %v1109, %v1108
  %v1512 = vpack.c.b16 %v1111, %v1110
  %v1513 = vpack.c.b16 %v1113, %v1112
  %v1514 = vpack.c.b16 %v1115, %v1114
  %v1515 = vpack.c.b16 %v1117, %v1116
  %v1516 = vpack.c.b16 %v1119, %v1118
  %v1517 = vpack.c.b16 %v1121, %v1120
  %v1518 = vpack.c.b16 %v1123, %v1122
  %v1519 = vpack.c.b16 %v1125, %v1124
  %v1520 = vpack.c.b16 %v1127, %v1126
  %v1521 = vpack.c.b16 %v1129, %v1128
  %v1522 = vpack.c.b16 %v1131, %v1130
  %v1523 = vpack.c.b16 %v1133, %v1132
  %v1524 = vpack.c.b16 %v1135, %v1134
  %v1525 = vpack.c.b16 %v1137, %v1136
  %v1526 = vpack.c.b16 %v1139, %v1138
  %v1527 = vpack.c.b16 %v1141, %v1140
  %v1528 = vpack.c.b16 %v1143, %v1142
  %v1529 = vpack.c.b16 %v1145, %v1144
  %v1530 = vpack.c.b16 %v1147, %v1146
  %v1531 = vpack.c.b16 %v1149, %v1148
  %v1532 = vpack.c.b16 %v1151, %v1150
  %v1533 = vpack.c.b16 %v1153, %v1152
  %v1534 = vpack.c.b16 %v1155, %v1154
  %v1535 = vpack.c.b16 %v1157, %v1156
  %v1536 = vpack.c.b16 %v1159, %v1158
  %v1537 = vpack.c.b16 %v1161, %v1160
  %v1538 = vpack.c.b16 %v1163, %v1162
  %v1539 = vpack.c.b16 %v1165, %v1164
  %v1540 = vpack.c.b16 %v1167, %v1166
  %v1541 = vpack.c.b16 %v1169, %v1168
  %v1542 = vpack.c.b16 %v1171, %v1170
  %v1543 = vpack.c.b16 %v1173, %v1172
  %v1544 = vpack.c.b16 %v1175, %v1174
  %v1545 = vpack.c.b16 %v1177, %v1176
  %v1546 = vpack.c.b16 %v1179, %v1178
  %v1547 = vpack.c.b16 %v1181, %v1180
  %v1548 = vpack.c.b16 %v1183, %v1182
  %v1549 = vpack.c.b16 %v1185, %v1184
  %v1550 = vpack.c.b16 %v1187, %v1186
  %v1551 = vpack.c.b16 %v1189, %v1188
  %v1552 = vpack.c.b16 %v1191, %v1190
  %v1553 = vpack.c.b16 %v1193, %v1192
  %v1554 = vpack.c.b16 %v1195, %v1194
  %v1555 = vpack.c.b16 %v1197, %v1196
  %v1556 = vpack.c.b16 %v1199, %v1198
  %v1557 = vpack.c.b16 %v1201, %v1200
  %v1558 = vpack.c.b16 %v1203, %v1202
  %v1559 = vpack.c.b16 %v1205, %v1204
  %v1560 = vpack.c.b16 %v1207, %v1206
  %v1561 = vpack.c.b16 %v1209, %v1208
  %v1562 = vpack.c.b16 %v1211, %v1210
  %v1563 = vpack.c.b16 %v1213, %v1212
  %v1564 = vpack.c.b16 %v1215, %v1214
  %v1565 = vpack.c.b16 %v1217, %v1216
  %v1566 = vpack.c.b16 %v1219, %v1218
  %v1567 = vpack.c.b16 %v1221, %v1220
  %v1568 = vpack.c.b16 %v1223, %v1222
  %v1569 = vpack.c.b16 %v1225, %v1224
  %v1570 = vpack.c.b16 %v1227, %v1226
  %v1571 = vpack.c.b16 %v1229, %v1228
  %v1572 = vpack.c.b16 %v1231, %v1230
  %v1573 = vpack.c.b16 %v1233, %v1232
  %v1574 = vpack.c.b16 %v1235, %v1234
  %v1575 = vpack.c.b16 %v1237, %v1236
  %v1576 = vpack.c.b16 %v1239, %v1238
  %v1577 = vpack.c.b16 %v1241, %v1240
  %v1578 = vpack.c.b16 %v1243, %v1242
  %v1579 = vpack.c.b16 %v1245, %v1244
  %v1580 = vpack.c.b16 %v1247, %v1246
  %v1581 = vpack.c.b16 %v1249, %v1248
  %v1582 = vpack.c.b16 %v1251, %v1250
  %v1583 = vpack.c.b16 %v1253, %v1252
  %v1584 = vpack.c.b16 %v1255, %v1254
  %v1585 = vpack.c.b16 %v1257, %v1256
  %v1586 = vpack.c.b16 %v1259, %v1258
  %v1587 = vpack.c.b16 %v1261, %v1260
  %v1588 = vpack.c.b16 %v1263, %v1262
  %v1589 = vpack.c.b16 %v1265, %v1264
  %v1590 = vpack.c.b16 %v1267, %v1266
  %v1591 = vpack.c.b16 %v1269, %v1268
  %v1592 = vpack.c.b16 %v1271, %v1270
  %v1593 = vpack.c.b16 %v1273, %v1272
  %v1594 = vpack.c.b16 %v1275, %v1274
  %v1595 = vpack.c.b16 %v1277, %v1276
  %v1596 = vpack.c.b16 %v1279, %v1278
  %v1597 = vpack.c.b16 %v1281, %v1280
  %v1598 = vpack.c.b16 %v1283, %v1282
  %v1599 = vpack.c.b16 %v1285, %v1284
  %v1600 = vpack.c.b16 %v1287, %v1286
  %v1601 = vpack.c.b16 %v1289, %v1288
  %v1602 = vpack.c.b16 %v1291, %v1290
  %v1603 = vpack.c.b16 %v1293, %v1292
  %v1604 = vpack.c.b16 %v1295, %v1294
  %v1605 = vpack.c.b16 %v1297, %v1296
  %v1606 = vpack.c.b16 %v1299, %v1298
  %v1607 = vpack.c.b16 %v1301, %v1300
  %v1608 = vpack.c.b16 %v1303, %v1302
  %v1609 = vpack.c.b16 %v1305, %v1304
  %v1610 = vpack.c.b16 %v1307, %v1306
  %v1611 = vpack.c.b16 %v1309, %v1308
  %v1612 = vpack.c.b16 %v1311, %v1310
  %v1613 = vpack.c.b16 %v1313, %v1312
  %v1614 = vpack.c.b16 %v1315, %v1314
  %v1615 = vpack.c.b16 %v1317, %v1316
  %v1616 = vpack.c.b16 %v1319, %v1318
  %v1617 = vpack.c.b16 %v1321, %v1320
  %v1618 = vpack.c.b16 %v1323, %v1322
  %v1619 = vpack.c.b16 %v1325, %v1324
  %v1620 = vpack.c.b16 %v1327, %v1326
  %v1621 = vpack.c.b16 %v1329, %v1328
  %v1622 = vpack.c.b16 %v1331, %v1330
  %v1623 = vpack.c.b16 %v1333, %v1332
  %v1624 = vpack.c.b16 %v1335, %v1334
  %v1625 = vpack.c.b16 %v1337, %v1336
  %v1626 = vpack.c.b16 %v1339, %v1338
  %v1627 = vpack.c.b16 %v1341, %v1340
  %v1628 = vpack.c.b16 %v1343, %v1342
  %v1629 = vpack.c.b16 %v1345, %v1344
  %v1630 = vpack.c.b16 %v1347, %v1346
  %v1631 = vpack.c.b16 %v1349, %v1348
  %v1632 = vpack.c.b16 %v1351, %v1350
  %v1633 = vpack.c.b16 %v1353, %v1352
  %v1634 = vpack.c.b16 %v1355, %v1354
  %v1635 = vpack.c.b16 %v1357, %v1356
  %v1636 = vpack.c.b16 %v1359, %v1358
  %v1637 = vpack.c.b16 %v1361, %v1360
  %v1638 = vpack.c.b16 %v1363, %v1362
  %v1639 = vpack.c.b16 %v1365, %v1364
  %v1640 = vpack.c.b16 %v1367, %v1366
  %v1641 = vpack.c.b16 %v1369, %v1368
  %v1642 = vpack.c.b16 %v1371, %v1370
  %v1643 = vpack.c.b16 %v1373, %v1372
  %v1644 = vpack.c.b16 %v1375, %v1374
  %v1645 = vpack.c.b16 %v1377, %v1376
  %v1646 = vpack.c.b16 %v1379, %v1378
  %v1647 = vpack.c.b16 %v1381, %v1380
  %v1648 = vpack.c.b16 %v1383, %v1382
  %v1649 = vpack.c.b16 %v1385, %v1384
  %v1650 = vpack.c.b16 %v1387, %v1386
  %v1651 = vpack.c.b16 %v1389, %v1388
  %v1652 = vpack.c.b16 %v1391, %v1390
  %v1653 = vpack.c.b16 %v1393, %v1392
  %v1654 = vpack.c.b16 %v1395, %v1394
  %v1655 = vpack.c.b16 %v1397, %v1396
  %v1656 = vpack.c.b16 %v1399, %v1398
  %v1657 = vpack.c.b16 %v1401, %v1400
  %v1658 = vpack.c.b16 %v1403, %v1402
  %v1659 = vpack.c.b16 %v1405, %v1404
  %v1660 = vpack.c.b16 %v1407, %v1406
  %v1661 = vpack.c.b16 %v1409, %v1408
  %v1662 = vpack.c.b16 %v1411, %v1410
  %v1663 = vpack.c.b16 %v1413, %v1412
  %v1664 = vpack.c.b16 %v1415, %v1414
  %v1665 = vpack.c.b16 %v1417, %v1416
  %v1666 = vpack.c.b16 %v1419, %v1418
  %v1667 = vpack.c.b16 %v1421, %v1420
  %v1668 = vpack.c.b16 %v1423, %v1422
  %v1669 = vpack.c.b16 %v1425, %v1424
  %v1670 = vpack.c.b16 %v1427, %v1426
  %v1671 = vpack.c.b16 %v1429, %v1428
  %v1672 = vpack.c.b16 %v1431, %v1430
  %v1673 = vpack.c.b16 %v1433, %v1432
  %v1674 = vpack.c.b16 %v1435, %v1434
  %v1675 = vpack.c.b16 %v1437, %v1436
  %v1676 = vpack.c.b16 %v1439, %v1438
  %v1677 = vpack.c.b16 %v1441, %v1440
  %v1678 = vpack.c.b16 %v1443, %v1442
  %v1679 = vpack.c.b16 %v1445, %v1444
  %v1680 = vpack.c.b16 %v1447, %v1446
  %v1681 = vpack.c.b16 %v1449, %v1448
  %v1682 = vpack.c.b16 %v1451, %v1450
  %v1683 = vpack.c.b16 %v1453, %v1452
  %v1684 = vpack.c.b16 %v1455, %v1454
  %v1685 = vpack.c.b16 %v1457, %v1456
  %v1686 = vpack.c.b16 %v1459, %v1458
  %v1687 = vpack.c.b16 %v1461, %v1460
  %v1688 = vpack.c.b16 %v1463, %v1462
  %v1689 = vpack.c.b16 %v1465, %v1464
  %v1690 = vpack.c.b16 %v1467, %v1466
  %v1691 = vpack.c.b16 %v1469, %v1468
  %v1692 = vpack.c.b16 %v1471, %v1470
  %v1693 = vpack.c.b16 %v1473, %v1472
  %v1694 = vpack.c.b16 %v1475, %v1474
  %v1695 = vpack.c.b16 %v1477, %v1476
  %v1696 = vpack.c.b16 %v1479, %v1478
  %v1697 = vpack.c.b16 %v1481, %v1480
  %1914 = vmatprep.subr.bf16.mxu0 0
  %1915 = vmatpush1.bf16.msra.mxu0 %v1482
  %1916 = vmatprep.subr.bf16.mxu0 0
  %1917 = vmatpush1.bf16.msra.mxu0 %v1483
  %1918 = vmatprep.subr.bf16.mxu0 0
  %1919 = vmatpush1.bf16.msra.mxu0 %v1484
  %1920 = vmatprep.subr.bf16.mxu0 0
  %1921 = vmatpush1.bf16.msra.mxu0 %v1485
  %1922 = vmatprep.subr.bf16.mxu0 0
  %1923 = vmatpush1.bf16.msra.mxu0 %v1486
  %1924 = vmatprep.subr.bf16.mxu0 0
  %1925 = vmatpush1.bf16.msra.mxu0 %v1487
  %1926 = vmatprep.subr.bf16.mxu0 0
  %1927 = vmatpush1.bf16.msra.mxu0 %v1488
  %1928 = vmatprep.subr.bf16.mxu0 0
  %1929 = vmatpush1.bf16.msra.mxu0 %v1489
  %1930 = vmatprep.subr.bf16.mxu0 0
  %1931 = vmatpush1.bf16.msra.mxu0 %v1490
  %1932 = vmatprep.subr.bf16.mxu0 0
  %1933 = vmatpush1.bf16.msra.mxu0 %v1491
  %1934 = vmatprep.subr.bf16.mxu0 0
  %1935 = vmatpush1.bf16.msra.mxu0 %v1492
  %1936 = vmatprep.subr.bf16.mxu0 0
  %1937 = vmatpush1.bf16.msra.mxu0 %v1493
  %1938 = vmatprep.subr.bf16.mxu0 0
  %1939 = vmatpush1.bf16.msra.mxu0 %v1494
  %1940 = vmatprep.subr.bf16.mxu0 0
  %1941 = vmatpush1.bf16.msra.mxu0 %v1495
  %1942 = vmatprep.subr.bf16.mxu0 0
  %1943 = vmatpush1.bf16.msra.mxu0 %v1496
  %1944 = vmatprep.subr.bf16.mxu0 0
  %1945 = vmatpush1.bf16.msra.mxu0 %v1497
  %1946 = vmatprep.mubr.bf16.mxu0 %v565
  %1947 = vmatmul.mubr.bf16.gmra.mrb[0].mxu0 %v564
  %v1948 = vpop.f32.mrb[0].mxu0
  %v1949 = vadd.f32 %v480, %v1948
  %v1950 = vpop.f32.mrb[0].mxu0
  %v1951 = vpop.f32.mrb[0].mxu0
  %v1952 = vadd.f32 %v480, %v1951
  %v1953 = vpop.f32.mrb[0].mxu0
  %1954 = vdwg.mxu0
  %1955 = vmatprep.subr.bf16.mxu0 0
  %1956 = vmatpush1.bf16.msra.mxu0 %v1498
  %1957 = vmatprep.subr.bf16.mxu0 0
  %1958 = vmatpush1.bf16.msra.mxu0 %v1499
  %1959 = vmatprep.subr.bf16.mxu0 0
  %1960 = vmatpush1.bf16.msra.mxu0 %v1500
  %1961 = vmatprep.subr.bf16.mxu0 0
  %1962 = vmatpush1.bf16.msra.mxu0 %v1501
  %1963 = vmatprep.subr.bf16.mxu0 0
  %1964 = vmatpush1.bf16.msra.mxu0 %v1502
  %1965 = vmatprep.subr.bf16.mxu0 0
  %1966 = vmatpush1.bf16.msra.mxu0 %v1503
  %1967 = vmatprep.subr.bf16.mxu0 0
  %1968 = vmatpush1.bf16.msra.mxu0 %v1504
  %1969 = vmatprep.subr.bf16.mxu0 0
  %1970 = vmatpush1.bf16.msra.mxu0 %v1505
  %1971 = vmatprep.subr.bf16.mxu0 0
  %1972 = vmatpush1.bf16.msra.mxu0 %v1506
  %1973 = vmatprep.subr.bf16.mxu0 0
  %1974 = vmatpush1.bf16.msra.mxu0 %v1507
  %1975 = vmatprep.subr.bf16.mxu0 0
  %1976 = vmatpush1.bf16.msra.mxu0 %v1508
  %1977 = vmatprep.subr.bf16.mxu0 0
  %1978 = vmatpush1.bf16.msra.mxu0 %v1509
  %1979 = vmatprep.subr.bf16.mxu0 0
  %1980 = vmatpush1.bf16.msra.mxu0 %v1510
  %1981 = vmatprep.subr.bf16.mxu0 0
  %1982 = vmatpush1.bf16.msra.mxu0 %v1511
  %1983 = vmatprep.subr.bf16.mxu0 0
  %1984 = vmatpush1.bf16.msra.mxu0 %v1512
  %1985 = vmatprep.subr.bf16.mxu0 0
  %1986 = vmatpush1.bf16.msra.mxu0 %v1513
  %1987 = vmatprep.mubr.bf16.mxu0 %v567
  %1988 = vmatmul.mubr.bf16.gmra.mrb[0].mxu0 %v566
  %v1989 = vpop.f32.mrb[0].mxu0
  %v1990 = vadd.f32 %v1949, %v1989
  %v1991 = vpop.f32.mrb[0].mxu0
  %v1992 = vpop.f32.mrb[0].mxu0
  %v1993 = vadd.f32 %v1952, %v1992
  %v1994 = vpop.f32.mrb[0].mxu0
  %1995 = vdwg.mxu0
  %1996 = vmatprep.subr.bf16.mxu0 0
  %1997 = vmatpush1.bf16.msra.mxu0 %v1514
  %1998 = vmatprep.subr.bf16.mxu0 0
  %1999 = vmatpush1.bf16.msra.mxu0 %v1515
  %2000 = vmatprep.subr.bf16.mxu0 0
  %2001 = vmatpush1.bf16.msra.mxu0 %v1516
  %2002 = vmatprep.subr.bf16.mxu0 0
  %2003 = vmatpush1.bf16.msra.mxu0 %v1517
  %2004 = vmatprep.subr.bf16.mxu0 0
  %2005 = vmatpush1.bf16.msra.mxu0 %v1518
  %2006 = vmatprep.subr.bf16.mxu0 0
  %2007 = vmatpush1.bf16.msra.mxu0 %v1519
  %2008 = vmatprep.subr.bf16.mxu0 0
  %2009 = vmatpush1.bf16.msra.mxu0 %v1520
  %2010 = vmatprep.subr.bf16.mxu0 0
  %2011 = vmatpush1.bf16.msra.mxu0 %v1521
  %2012 = vmatprep.subr.bf16.mxu0 0
  %2013 = vmatpush1.bf16.msra.mxu0 %v1522
  %2014 = vmatprep.subr.bf16.mxu0 0
  %2015 = vmatpush1.bf16.msra.mxu0 %v1523
  %2016 = vmatprep.subr.bf16.mxu0 0
  %2017 = vmatpush1.bf16.msra.mxu0 %v1524
  %2018 = vmatprep.subr.bf16.mxu0 0
  %2019 = vmatpush1.bf16.msra.mxu0 %v1525
  %2020 = vmatprep.subr.bf16.mxu0 0
  %2021 = vmatpush1.bf16.msra.mxu0 %v1526
  %2022 = vmatprep.subr.bf16.mxu0 0
  %2023 = vmatpush1.bf16.msra.mxu0 %v1527
  %2024 = vmatprep.subr.bf16.mxu0 0
  %2025 = vmatpush1.bf16.msra.mxu0 %v1528
  %2026 = vmatprep.subr.bf16.mxu0 0
  %2027 = vmatpush1.bf16.msra.mxu0 %v1529
  %2028 = vmatprep.mubr.bf16.mxu0 %v569
  %2029 = vmatmul.mubr.bf16.gmra.mrb[0].mxu0 %v568
  %v2030 = vpop.f32.mrb[0].mxu0
  %v2031 = vadd.f32 %v1990, %v2030
  %v2032 = vpop.f32.mrb[0].mxu0
  %v2033 = vpop.f32.mrb[0].mxu0
  %v2034 = vadd.f32 %v1993, %v2033
  %v2035 = vpop.f32.mrb[0].mxu0
  %2036 = vdwg.mxu0
  %2037 = vmatprep.subr.bf16.mxu0 0
  %2038 = vmatpush1.bf16.msra.mxu0 %v1530
  %2039 = vmatprep.subr.bf16.mxu0 0
  %2040 = vmatpush1.bf16.msra.mxu0 %v1531
  %2041 = vmatprep.subr.bf16.mxu0 0
  %2042 = vmatpush1.bf16.msra.mxu0 %v1532
  %2043 = vmatprep.subr.bf16.mxu0 0
  %2044 = vmatpush1.bf16.msra.mxu0 %v1533
  %2045 = vmatprep.subr.bf16.mxu0 0
  %2046 = vmatpush1.bf16.msra.mxu0 %v1534
  %2047 = vmatprep.subr.bf16.mxu0 0
  %2048 = vmatpush1.bf16.msra.mxu0 %v1535
  %2049 = vmatprep.subr.bf16.mxu0 0
  %2050 = vmatpush1.bf16.msra.mxu0 %v1536
  %2051 = vmatprep.subr.bf16.mxu0 0
  %2052 = vmatpush1.bf16.msra.mxu0 %v1537
  %2053 = vmatprep.subr.bf16.mxu0 0
  %2054 = vmatpush1.bf16.msra.mxu0 %v1538
  %2055 = vmatprep.subr.bf16.mxu0 0
  %2056 = vmatpush1.bf16.msra.mxu0 %v1539
  %2057 = vmatprep.subr.bf16.mxu0 0
  %2058 = vmatpush1.bf16.msra.mxu0 %v1540
  %2059 = vmatprep.subr.bf16.mxu0 0
  %2060 = vmatpush1.bf16.msra.mxu0 %v1541
  %2061 = vmatprep.subr.bf16.mxu0 0
  %2062 = vmatpush1.bf16.msra.mxu0 %v1542
  %2063 = vmatprep.subr.bf16.mxu0 0
  %2064 = vmatpush1.bf16.msra.mxu0 %v1543
  %2065 = vmatprep.subr.bf16.mxu0 0
  %2066 = vmatpush1.bf16.msra.mxu0 %v1544
  %2067 = vmatprep.subr.bf16.mxu0 0
  %2068 = vmatpush1.bf16.msra.mxu0 %v1545
  %2069 = vmatprep.mubr.bf16.mxu0 %v571
  %2070 = vmatmul.mubr.bf16.gmra.mrb[0].mxu0 %v570
  %v2071 = vpop.f32.mrb[0].mxu0
  %v2072 = vadd.f32 %v2031, %v2071
  %v2073 = vpop.f32.mrb[0].mxu0
  %v2074 = vpop.f32.mrb[0].mxu0
  %v2075 = vadd.f32 %v2034, %v2074
  %v2076 = vpop.f32.mrb[0].mxu0
  %2077 = vdwg.mxu0
  %2078 = vmatprep.subr.bf16.mxu0 0
  %2079 = vmatpush1.bf16.msra.mxu0 %v1546
  %2080 = vmatprep.subr.bf16.mxu0 0
  %2081 = vmatpush1.bf16.msra.mxu0 %v1547
  %2082 = vmatprep.subr.bf16.mxu0 0
  %2083 = vmatpush1.bf16.msra.mxu0 %v1548
  %2084 = vmatprep.subr.bf16.mxu0 0
  %2085 = vmatpush1.bf16.msra.mxu0 %v1549
  %2086 = vmatprep.subr.bf16.mxu0 0
  %2087 = vmatpush1.bf16.msra.mxu0 %v1550
  %2088 = vmatprep.subr.bf16.mxu0 0
  %2089 = vmatpush1.bf16.msra.mxu0 %v1551
  %2090 = vmatprep.subr.bf16.mxu0 0
  %2091 = vmatpush1.bf16.msra.mxu0 %v1552
  %2092 = vmatprep.subr.bf16.mxu0 0
  %2093 = vmatpush1.bf16.msra.mxu0 %v1553
  %2094 = vmatprep.subr.bf16.mxu0 0
  %2095 = vmatpush1.bf16.msra.mxu0 %v1554
  %2096 = vmatprep.subr.bf16.mxu0 0
  %2097 = vmatpush1.bf16.msra.mxu0 %v1555
  %2098 = vmatprep.subr.bf16.mxu0 0
  %2099 = vmatpush1.bf16.msra.mxu0 %v1556
  %2100 = vmatprep.subr.bf16.mxu0 0
  %2101 = vmatpush1.bf16.msra.mxu0 %v1557
  %2102 = vmatprep.subr.bf16.mxu0 0
  %2103 = vmatpush1.bf16.msra.mxu0 %v1558
  %2104 = vmatprep.subr.bf16.mxu0 0
  %2105 = vmatpush1.bf16.msra.mxu0 %v1559
  %2106 = vmatprep.subr.bf16.mxu0 0
  %2107 = vmatpush1.bf16.msra.mxu0 %v1560
  %2108 = vmatprep.subr.bf16.mxu0 0
  %2109 = vmatpush1.bf16.msra.mxu0 %v1561
  %2110 = vmatprep.mubr.bf16.mxu0 %v573
  %2111 = vmatmul.mubr.bf16.gmra.mrb[0].mxu0 %v572
  %v2112 = vpop.f32.mrb[0].mxu0
  %v2113 = vadd.f32 %v2072, %v2112
  %v2114 = vpop.f32.mrb[0].mxu0
  %v2115 = vpop.f32.mrb[0].mxu0
  %v2116 = vadd.f32 %v2075, %v2115
  %v2117 = vpop.f32.mrb[0].mxu0
  %2118 = vdwg.mxu0
  %2119 = vmatprep.subr.bf16.mxu0 0
  %2120 = vmatpush1.bf16.msra.mxu0 %v1562
  %2121 = vmatprep.subr.bf16.mxu0 0
  %2122 = vmatpush1.bf16.msra.mxu0 %v1563
  %2123 = vmatprep.subr.bf16.mxu0 0
  %2124 = vmatpush1.bf16.msra.mxu0 %v1564
  %2125 = vmatprep.subr.bf16.mxu0 0
  %2126 = vmatpush1.bf16.msra.mxu0 %v1565
  %2127 = vmatprep.subr.bf16.mxu0 0
  %2128 = vmatpush1.bf16.msra.mxu0 %v1566
  %2129 = vmatprep.subr.bf16.mxu0 0
  %2130 = vmatpush1.bf16.msra.mxu0 %v1567
  %2131 = vmatprep.subr.bf16.mxu0 0
  %2132 = vmatpush1.bf16.msra.mxu0 %v1568
  %2133 = vmatprep.subr.bf16.mxu0 0
  %2134 = vmatpush1.bf16.msra.mxu0 %v1569
  %2135 = vmatprep.subr.bf16.mxu0 0
  %2136 = vmatpush1.bf16.msra.mxu0 %v1570
  %2137 = vmatprep.subr.bf16.mxu0 0
  %2138 = vmatpush1.bf16.msra.mxu0 %v1571
  %2139 = vmatprep.subr.bf16.mxu0 0
  %2140 = vmatpush1.bf16.msra.mxu0 %v1572
  %2141 = vmatprep.subr.bf16.mxu0 0
  %2142 = vmatpush1.bf16.msra.mxu0 %v1573
  %2143 = vmatprep.subr.bf16.mxu0 0
  %2144 = vmatpush1.bf16.msra.mxu0 %v1574
  %2145 = vmatprep.subr.bf16.mxu0 0
  %2146 = vmatpush1.bf16.msra.mxu0 %v1575
  %2147 = vmatprep.subr.bf16.mxu0 0
  %2148 = vmatpush1.bf16.msra.mxu0 %v1576
  %2149 = vmatprep.subr.bf16.mxu0 0
  %2150 = vmatpush1.bf16.msra.mxu0 %v1577
  %2151 = vmatprep.mubr.bf16.mxu0 %v575
  %2152 = vmatmul.mubr.bf16.gmra.mrb[0].mxu0 %v574
  %v2153 = vpop.f32.mrb[0].mxu0
  %v2154 = vadd.f32 %v2113, %v2153
  %v2155 = vpop.f32.mrb[0].mxu0
  %v2156 = vpop.f32.mrb[0].mxu0
  %v2157 = vadd.f32 %v2116, %v2156
  %v2158 = vpop.f32.mrb[0].mxu0
  %2159 = vdwg.mxu0
  %2160 = vmatprep.subr.bf16.mxu0 0
  %2161 = vmatpush1.bf16.msra.mxu0 %v1578
  %2162 = vmatprep.subr.bf16.mxu0 0
  %2163 = vmatpush1.bf16.msra.mxu0 %v1579
  %2164 = vmatprep.subr.bf16.mxu0 0
  %2165 = vmatpush1.bf16.msra.mxu0 %v1580
  %2166 = vmatprep.subr.bf16.mxu0 0
  %2167 = vmatpush1.bf16.msra.mxu0 %v1581
  %2168 = vmatprep.subr.bf16.mxu0 0
  %2169 = vmatpush1.bf16.msra.mxu0 %v1582
  %2170 = vmatprep.subr.bf16.mxu0 0
  %2171 = vmatpush1.bf16.msra.mxu0 %v1583
  %2172 = vmatprep.subr.bf16.mxu0 0
  %2173 = vmatpush1.bf16.msra.mxu0 %v1584
  %2174 = vmatprep.subr.bf16.mxu0 0
  %2175 = vmatpush1.bf16.msra.mxu0 %v1585
  %2176 = vmatprep.subr.bf16.mxu0 0
  %2177 = vmatpush1.bf16.msra.mxu0 %v1586
  %2178 = vmatprep.subr.bf16.mxu0 0
  %2179 = vmatpush1.bf16.msra.mxu0 %v1587
  %2180 = vmatprep.subr.bf16.mxu0 0
  %2181 = vmatpush1.bf16.msra.mxu0 %v1588
  %2182 = vmatprep.subr.bf16.mxu0 0
  %2183 = vmatpush1.bf16.msra.mxu0 %v1589
  %2184 = vmatprep.subr.bf16.mxu0 0
  %2185 = vmatpush1.bf16.msra.mxu0 %v1590
  %2186 = vmatprep.subr.bf16.mxu0 0
  %2187 = vmatpush1.bf16.msra.mxu0 %v1591
  %2188 = vmatprep.subr.bf16.mxu0 0
  %2189 = vmatpush1.bf16.msra.mxu0 %v1592
  %2190 = vmatprep.subr.bf16.mxu0 0
  %2191 = vmatpush1.bf16.msra.mxu0 %v1593
  %2192 = vmatprep.mubr.bf16.mxu0 %v577
  %2193 = vmatmul.mubr.bf16.gmra.mrb[0].mxu0 %v576
  %v2194 = vpop.f32.mrb[0].mxu0
  %v2195 = vadd.f32 %v2154, %v2194
  %v2196 = vpop.f32.mrb[0].mxu0
  %v2197 = vpop.f32.mrb[0].mxu0
  %v2198 = vadd.f32 %v2157, %v2197
  %v2199 = vpop.f32.mrb[0].mxu0
  %2200 = vdwg.mxu0
  %2201 = vmatprep.subr.bf16.mxu0 0
  %2202 = vmatpush1.bf16.msra.mxu0 %v1594
  %2203 = vmatprep.subr.bf16.mxu0 0
  %2204 = vmatpush1.bf16.msra.mxu0 %v1595
  %2205 = vmatprep.subr.bf16.mxu0 0
  %2206 = vmatpush1.bf16.msra.mxu0 %v1596
  %2207 = vmatprep.subr.bf16.mxu0 0
  %2208 = vmatpush1.bf16.msra.mxu0 %v1597
  %2209 = vmatprep.subr.bf16.mxu0 0
  %2210 = vmatpush1.bf16.msra.mxu0 %v1598
  %2211 = vmatprep.subr.bf16.mxu0 0
  %2212 = vmatpush1.bf16.msra.mxu0 %v1599
  %2213 = vmatprep.subr.bf16.mxu0 0
  %2214 = vmatpush1.bf16.msra.mxu0 %v1600
  %2215 = vmatprep.subr.bf16.mxu0 0
  %2216 = vmatpush1.bf16.msra.mxu0 %v1601
  %2217 = vmatprep.subr.bf16.mxu0 0
  %2218 = vmatpush1.bf16.msra.mxu0 %v1602
  %2219 = vmatprep.subr.bf16.mxu0 0
  %2220 = vmatpush1.bf16.msra.mxu0 %v1603
  %2221 = vmatprep.subr.bf16.mxu0 0
  %2222 = vmatpush1.bf16.msra.mxu0 %v1604
  %2223 = vmatprep.subr.bf16.mxu0 0
  %2224 = vmatpush1.bf16.msra.mxu0 %v1605
  %2225 = vmatprep.subr.bf16.mxu0 0
  %2226 = vmatpush1.bf16.msra.mxu0 %v1606
  %2227 = vmatprep.subr.bf16.mxu0 0
  %2228 = vmatpush1.bf16.msra.mxu0 %v1607
  %2229 = vmatprep.subr.bf16.mxu0 0
  %2230 = vmatpush1.bf16.msra.mxu0 %v1608
  %2231 = vmatprep.subr.bf16.mxu0 0
  %2232 = vmatpush1.bf16.msra.mxu0 %v1609
  %2233 = vmatprep.mubr.bf16.mxu0 %v579
  %2234 = vmatmul.mubr.bf16.gmra.mrb[0].mxu0 %v578
  %v2235 = vpop.f32.mrb[0].mxu0
  %v2236 = vadd.f32 %v2195, %v2235
  %v2237 = vpop.f32.mrb[0].mxu0
  %v2238 = vpop.f32.mrb[0].mxu0
  %v2239 = vadd.f32 %v2198, %v2238
  %v2240 = vpop.f32.mrb[0].mxu0
  %2241 = vdwg.mxu0
  %2242 = vmatprep.subr.bf16.mxu0 0
  %2243 = vmatpush1.bf16.msra.mxu0 %v1610
  %2244 = vmatprep.subr.bf16.mxu0 0
  %2245 = vmatpush1.bf16.msra.mxu0 %v1611
  %2246 = vmatprep.subr.bf16.mxu0 0
  %2247 = vmatpush1.bf16.msra.mxu0 %v1612
  %2248 = vmatprep.subr.bf16.mxu0 0
  %2249 = vmatpush1.bf16.msra.mxu0 %v1613
  %2250 = vmatprep.subr.bf16.mxu0 0
  %2251 = vmatpush1.bf16.msra.mxu0 %v1614
  %2252 = vmatprep.subr.bf16.mxu0 0
  %2253 = vmatpush1.bf16.msra.mxu0 %v1615
  %2254 = vmatprep.subr.bf16.mxu0 0
  %2255 = vmatpush1.bf16.msra.mxu0 %v1616
  %2256 = vmatprep.subr.bf16.mxu0 0
  %2257 = vmatpush1.bf16.msra.mxu0 %v1617
  %2258 = vmatprep.subr.bf16.mxu0 0
  %2259 = vmatpush1.bf16.msra.mxu0 %v1618
  %2260 = vmatprep.subr.bf16.mxu0 0
  %2261 = vmatpush1.bf16.msra.mxu0 %v1619
  %2262 = vmatprep.subr.bf16.mxu0 0
  %2263 = vmatpush1.bf16.msra.mxu0 %v1620
  %2264 = vmatprep.subr.bf16.mxu0 0
  %2265 = vmatpush1.bf16.msra.mxu0 %v1621
  %2266 = vmatprep.subr.bf16.mxu0 0
  %2267 = vmatpush1.bf16.msra.mxu0 %v1622
  %2268 = vmatprep.subr.bf16.mxu0 0
  %2269 = vmatpush1.bf16.msra.mxu0 %v1623
  %2270 = vmatprep.subr.bf16.mxu0 0
  %2271 = vmatpush1.bf16.msra.mxu0 %v1624
  %2272 = vmatprep.subr.bf16.mxu0 0
  %2273 = vmatpush1.bf16.msra.mxu0 %v1625
  %2274 = vmatprep.mubr.bf16.mxu0 %v581
  %2275 = vmatmul.mubr.bf16.gmra.mrb[0].mxu0 %v580
  %v2276 = vpop.f32.mrb[0].mxu0
  %v2277 = vadd.f32 %v2236, %v2276
  %v2278 = vpop.f32.mrb[0].mxu0
  %v2279 = vpop.f32.mrb[0].mxu0
  %v2280 = vadd.f32 %v2239, %v2279
  %v2281 = vpop.f32.mrb[0].mxu0
  %2282 = vdwg.mxu0
  %2283 = vmatprep.subr.bf16.mxu0 0
  %2284 = vmatpush1.bf16.msra.mxu0 %v1626
  %2285 = vmatprep.subr.bf16.mxu0 0
  %2286 = vmatpush1.bf16.msra.mxu0 %v1627
  %2287 = vmatprep.subr.bf16.mxu0 0
  %2288 = vmatpush1.bf16.msra.mxu0 %v1628
  %2289 = vmatprep.subr.bf16.mxu0 0
  %2290 = vmatpush1.bf16.msra.mxu0 %v1629
  %2291 = vmatprep.subr.bf16.mxu0 0
  %2292 = vmatpush1.bf16.msra.mxu0 %v1630
  %2293 = vmatprep.subr.bf16.mxu0 0
  %2294 = vmatpush1.bf16.msra.mxu0 %v1631
  %2295 = vmatprep.subr.bf16.mxu0 0
  %2296 = vmatpush1.bf16.msra.mxu0 %v1632
  %2297 = vmatprep.subr.bf16.mxu0 0
  %2298 = vmatpush1.bf16.msra.mxu0 %v1633
  %2299 = vmatprep.subr.bf16.mxu0 0
  %2300 = vmatpush1.bf16.msra.mxu0 %v1634
  %2301 = vmatprep.subr.bf16.mxu0 0
  %2302 = vmatpush1.bf16.msra.mxu0 %v1635
  %2303 = vmatprep.subr.bf16.mxu0 0
  %2304 = vmatpush1.bf16.msra.mxu0 %v1636
  %2305 = vmatprep.subr.bf16.mxu0 0
  %2306 = vmatpush1.bf16.msra.mxu0 %v1637
  %2307 = vmatprep.subr.bf16.mxu0 0
  %2308 = vmatpush1.bf16.msra.mxu0 %v1638
  %2309 = vmatprep.subr.bf16.mxu0 0
  %2310 = vmatpush1.bf16.msra.mxu0 %v1639
  %2311 = vmatprep.subr.bf16.mxu0 0
  %2312 = vmatpush1.bf16.msra.mxu0 %v1640
  %2313 = vmatprep.subr.bf16.mxu0 0
  %2314 = vmatpush1.bf16.msra.mxu0 %v1641
  %2315 = vmatprep.mubr.bf16.mxu0 %v583
  %2316 = vmatmul.mubr.bf16.gmra.mrb[0].mxu0 %v582
  %v2317 = vpop.f32.mrb[0].mxu0
  %v2318 = vadd.f32 %v2277, %v2317
  %v2319 = vpop.f32.mrb[0].mxu0
  %v2320 = vpop.f32.mrb[0].mxu0
  %v2321 = vadd.f32 %v2280, %v2320
  %v2322 = vpop.f32.mrb[0].mxu0
  %2323 = vdwg.mxu0
  %2324 = vmatprep.subr.bf16.mxu0 0
  %2325 = vmatpush1.bf16.msra.mxu0 %v1642
  %2326 = vmatprep.subr.bf16.mxu0 0
  %2327 = vmatpush1.bf16.msra.mxu0 %v1643
  %2328 = vmatprep.subr.bf16.mxu0 0
  %2329 = vmatpush1.bf16.msra.mxu0 %v1644
  %2330 = vmatprep.subr.bf16.mxu0 0
  %2331 = vmatpush1.bf16.msra.mxu0 %v1645
  %2332 = vmatprep.subr.bf16.mxu0 0
  %2333 = vmatpush1.bf16.msra.mxu0 %v1646
  %2334 = vmatprep.subr.bf16.mxu0 0
  %2335 = vmatpush1.bf16.msra.mxu0 %v1647
  %2336 = vmatprep.subr.bf16.mxu0 0
  %2337 = vmatpush1.bf16.msra.mxu0 %v1648
  %2338 = vmatprep.subr.bf16.mxu0 0
  %2339 = vmatpush1.bf16.msra.mxu0 %v1649
  %2340 = vmatprep.subr.bf16.mxu0 0
  %2341 = vmatpush1.bf16.msra.mxu0 %v1650
  %2342 = vmatprep.subr.bf16.mxu0 0
  %2343 = vmatpush1.bf16.msra.mxu0 %v1651
  %2344 = vmatprep.subr.bf16.mxu0 0
  %2345 = vmatpush1.bf16.msra.mxu0 %v1652
  %2346 = vmatprep.subr.bf16.mxu0 0
  %2347 = vmatpush1.bf16.msra.mxu0 %v1653
  %2348 = vmatprep.subr.bf16.mxu0 0
  %2349 = vmatpush1.bf16.msra.mxu0 %v1654
  %2350 = vmatprep.subr.bf16.mxu0 0
  %2351 = vmatpush1.bf16.msra.mxu0 %v1655
  %2352 = vmatprep.subr.bf16.mxu0 0
  %2353 = vmatpush1.bf16.msra.mxu0 %v1656
  %2354 = vmatprep.subr.bf16.mxu0 0
  %2355 = vmatpush1.bf16.msra.mxu0 %v1657
  %2356 = vmatprep.mubr.bf16.mxu0 %v585
  %2357 = vmatmul.mubr.bf16.gmra.mrb[0].mxu0 %v584
  %v2358 = vpop.f32.mrb[0].mxu0
  %v2359 = vadd.f32 %v2318, %v2358
  %v2360 = vpop.f32.mrb[0].mxu0
  %v2361 = vpop.f32.mrb[0].mxu0
  %v2362 = vadd.f32 %v2321, %v2361
  %v2363 = vpop.f32.mrb[0].mxu0
  %2364 = vdwg.mxu0
  %2365 = vmatprep.subr.bf16.mxu0 0
  %2366 = vmatpush1.bf16.msra.mxu0 %v1658
  %2367 = vmatprep.subr.bf16.mxu0 0
  %2368 = vmatpush1.bf16.msra.mxu0 %v1659
  %2369 = vmatprep.subr.bf16.mxu0 0
  %2370 = vmatpush1.bf16.msra.mxu0 %v1660
  %2371 = vmatprep.subr.bf16.mxu0 0
  %2372 = vmatpush1.bf16.msra.mxu0 %v1661
  %2373 = vmatprep.subr.bf16.mxu0 0
  %2374 = vmatpush1.bf16.msra.mxu0 %v1662
  %2375 = vmatprep.subr.bf16.mxu0 0
  %2376 = vmatpush1.bf16.msra.mxu0 %v1663
  %2377 = vmatprep.subr.bf16.mxu0 0
  %2378 = vmatpush1.bf16.msra.mxu0 %v1664
  %2379 = vmatprep.subr.bf16.mxu0 0
  %2380 = vmatpush1.bf16.msra.mxu0 %v1665
  %2381 = vmatprep.subr.bf16.mxu0 0
  %2382 = vmatpush1.bf16.msra.mxu0 %v1666
  %2383 = vmatprep.subr.bf16.mxu0 0
  %2384 = vmatpush1.bf16.msra.mxu0 %v1667
  %2385 = vmatprep.subr.bf16.mxu0 0
  %2386 = vmatpush1.bf16.msra.mxu0 %v1668
  %2387 = vmatprep.subr.bf16.mxu0 0
  %2388 = vmatpush1.bf16.msra.mxu0 %v1669
  %2389 = vmatprep.subr.bf16.mxu0 0
  %2390 = vmatpush1.bf16.msra.mxu0 %v1670
  %2391 = vmatprep.subr.bf16.mxu0 0
  %2392 = vmatpush1.bf16.msra.mxu0 %v1671
  %2393 = vmatprep.subr.bf16.mxu0 0
  %2394 = vmatpush1.bf16.msra.mxu0 %v1672
  %2395 = vmatprep.subr.bf16.mxu0 0
  %2396 = vmatpush1.bf16.msra.mxu0 %v1673
  %2397 = vmatprep.mubr.bf16.mxu0 %v587
  %2398 = vmatmul.mubr.bf16.gmra.mrb[0].mxu0 %v586
  %v2399 = vpop.f32.mrb[0].mxu0
  %v2400 = vadd.f32 %v2359, %v2399
  %v2401 = vpop.f32.mrb[0].mxu0
  %v2402 = vpop.f32.mrb[0].mxu0
  %v2403 = vadd.f32 %v2362, %v2402
  %v2404 = vpop.f32.mrb[0].mxu0
  %2405 = vdwg.mxu0
  %2406 = vmatprep.subr.bf16.mxu0 0
  %2407 = vmatpush1.bf16.msra.mxu0 %v1674
  %2408 = vmatprep.subr.bf16.mxu0 0
  %2409 = vmatpush1.bf16.msra.mxu0 %v1675
  %2410 = vmatprep.subr.bf16.mxu0 0
  %2411 = vmatpush1.bf16.msra.mxu0 %v1676
  %2412 = vmatprep.subr.bf16.mxu0 0
  %2413 = vmatpush1.bf16.msra.mxu0 %v1677
  %2414 = vmatprep.subr.bf16.mxu0 0
  %2415 = vmatpush1.bf16.msra.mxu0 %v1678
  %2416 = vmatprep.subr.bf16.mxu0 0
  %2417 = vmatpush1.bf16.msra.mxu0 %v1679
  %2418 = vmatprep.subr.bf16.mxu0 0
  %2419 = vmatpush1.bf16.msra.mxu0 %v1680
  %2420 = vmatprep.subr.bf16.mxu0 0
  %2421 = vmatpush1.bf16.msra.mxu0 %v1681
  %2422 = vmatprep.subr.bf16.mxu0 0
  %2423 = vmatpush1.bf16.msra.mxu0 %v1682
  %2424 = vmatprep.subr.bf16.mxu0 0
  %2425 = vmatpush1.bf16.msra.mxu0 %v1683
  %2426 = vmatprep.subr.bf16.mxu0 0
  %2427 = vmatpush1.bf16.msra.mxu0 %v1684
  %2428 = vmatprep.subr.bf16.mxu0 0
  %2429 = vmatpush1.bf16.msra.mxu0 %v1685
  %2430 = vmatprep.subr.bf16.mxu0 0
  %2431 = vmatpush1.bf16.msra.mxu0 %v1686
  %2432 = vmatprep.subr.bf16.mxu0 0
  %2433 = vmatpush1.bf16.msra.mxu0 %v1687
  %2434 = vmatprep.subr.bf16.mxu0 0
  %2435 = vmatpush1.bf16.msra.mxu0 %v1688
  %2436 = vmatprep.subr.bf16.mxu0 0
  %2437 = vmatpush1.bf16.msra.mxu0 %v1689
  %2438 = vmatprep.mubr.bf16.mxu0 %v589
  %2439 = vmatmul.mubr.bf16.gmra.mrb[0].mxu0 %v588
  %v2440 = vpop.f32.mrb[0].mxu0
  %v2441 = vadd.f32 %v2400, %v2440
  %v2442 = vpop.f32.mrb[0].mxu0
  %v2443 = vpop.f32.mrb[0].mxu0
  %v2444 = vadd.f32 %v2403, %v2443
  %v2445 = vpop.f32.mrb[0].mxu0
  %2446 = vdwg.mxu0
  %2447 = vmatprep.subr.bf16.mxu0 0
  %2448 = vmatpush1.bf16.msra.mxu0 %v1690
  %2449 = vmatprep.subr.bf16.mxu0 0
  %2450 = vmatpush1.bf16.msra.mxu0 %v1691
  %2451 = vmatprep.subr.bf16.mxu0 0
  %2452 = vmatpush1.bf16.msra.mxu0 %v1692
  %2453 = vmatprep.subr.bf16.mxu0 0
  %2454 = vmatpush1.bf16.msra.mxu0 %v1693
  %2455 = vmatprep.subr.bf16.mxu0 0
  %2456 = vmatpush1.bf16.msra.mxu0 %v1694
  %2457 = vmatprep.subr.bf16.mxu0 0
  %2458 = vmatpush1.bf16.msra.mxu0 %v1695
  %2459 = vmatprep.subr.bf16.mxu0 0
  %2460 = vmatpush1.bf16.msra.mxu0 %v1696
  %2461 = vmatprep.subr.bf16.mxu0 0
  %2462 = vmatpush1.bf16.msra.mxu0 %v1697
  %2463 = vmatprep.subr.bf16.mxu0 0
  %2464 = vmatpush1.bf16.msra.mxu0 0
  %2465 = vmatprep.subr.bf16.mxu0 0
  %2466 = vmatpush1.bf16.msra.mxu0 0
  %2467 = vmatprep.subr.bf16.mxu0 0
  %2468 = vmatpush1.bf16.msra.mxu0 0
  %2469 = vmatprep.subr.bf16.mxu0 0
  %2470 = vmatpush1.bf16.msra.mxu0 0
  %2471 = vmatprep.subr.bf16.mxu0 0
  %2472 = vmatpush1.bf16.msra.mxu0 0
  %2473 = vmatprep.subr.bf16.mxu0 0
  %2474 = vmatpush1.bf16.msra.mxu0 0
  %2475 = vmatprep.subr.bf16.mxu0 0
  %2476 = vmatpush1.bf16.msra.mxu0 0
  %2477 = vmatprep.subr.bf16.mxu0 0
  %2478 = vmatpush1.bf16.msra.mxu0 0
  %2479 = vmatprep.mubr.bf16.mxu0 0
  %2480 = vmatmul.mubr.bf16.gmra.mrb[0].mxu0 %v590
  %v2481 = vpop.f32.mrb[0].mxu0
  %v2482 = vadd.f32 %v2441, %v2481
  %v2483 = vpop.f32.mrb[0].mxu0
  %v2484 = vpop.f32.mrb[0].mxu0
  %v2485 = vadd.f32 %v2444, %v2484
  %v2486 = vpop.f32.mrb[0].mxu0
  %2487 = vdwg.mxu0
  %v2488 = vmax.f32 %v2482, 0.0
  %v2489 = vmax.f32 %v2485, 0.0
  %v2490 = vpack.c.bf16 %v2489, %v2488
  %v2492 = vunpack.c.l.b16 %v2490
  %v2493 = vunpack.c.h.b16 %v2490
  %v2494 = vpack.c.b16 %v2492, %v2492
  %v2495 = vpack.c.b16 %v2493, %v2493
  %2498 = vst [vmem:[%s3] sm:$0xf] %v2494
  %2499 = vst [vmem:[%s3 + $0x4] sm:$0xf] %v2495
  // Predicated region
  $region14: #{net_forward.9} parent=0 // pred_check
    _
  $region15: #{net_forward.9} parent=0 // pred_check_branch
    %2501 = sbr.rel (0) target = $region17
  $region16: #{net_forward.9} parent=0 // pred_region
    _
  $region17: #{net_forward.9} parent=0 // pred_fallthru
    _
  // Predicated region
  $region18: #{net_forward.9} parent=0 // pred_check
    _
  $region19: #{net_forward.9} parent=0 // pred_check_branch
    %2503 = sbr.rel (0) target = $region21
  $region20: #{net_forward.9} parent=0 // pred_region
    _
  $region21: #{net_forward.9} parent=0 // pred_fallthru
    _

// kernel: net_forward.10
$region0: #{net_forward.10}
  #allocation0 [shape = 'u32[]', space=smem, size = 0x4, offset = 0x4, fixed_abs, tag = 'smem constant byte address 0x4 - core index']
  #allocation1 [shape = 'u32[144,128]{1,0:T(1,128)}', space=vmem, size = 0x12000, scoped, tag = 'internal scratch']
  %s0 = inlined_call_operand.vmem [shape: bf16[128,1792], index: 0, kind: input, shape index: {}]
  %s1 = inlined_call_operand.vmem [shape: bf16[1792,128], index: 1, kind: input, shape index: {}]
  %s2 = inlined_call_operand.vmem [shape: f32[1,128], index: 2, kind: input, shape index: {}]
  %s3 = inlined_call_operand.vmem [shape: bf16[128,128], index: 3, kind: output, shape index: {}]
  %s4 = sld [smem:[#allocation0]]
  $region22: #{net_forward.10} parent=0
    _
  %s6 = ssub.s32 1, %s4
  %s7 = scalar_select 0, %s6, %s4
  // Predicated region
  $region2: #{net_forward.10} parent=0 // pred_check
    _
  $region3: #{net_forward.10} parent=0 // pred_check_branch
    %9 = sbr.rel (0) target = $region5
  $region4: #{net_forward.10} parent=0 // pred_region
    _
  $region5: #{net_forward.10} parent=0 // pred_fallthru
    _
  // Predicated region
  $region6: #{net_forward.10} parent=0 // pred_check
    _
  $region7: #{net_forward.10} parent=0 // pred_check_branch
    %11 = sbr.rel (0) target = $region9
  $region8: #{net_forward.10} parent=0 // pred_region
    _
  $region9: #{net_forward.10} parent=0 // pred_fallthru
    _
  // Predicated region
  $region10: #{net_forward.10} parent=0 // pred_check
    _
  $region11: #{net_forward.10} parent=0 // pred_check_branch
    %13 = sbr.rel (0) target = $region13
  $region12: #{net_forward.10} parent=0 // pred_region
    _
  $region13: #{net_forward.10} parent=0 // pred_fallthru
    _
  %v15 = vld [vmem:[%s0] sm:$0xff]
  %v16 = vld [vmem:[%s0 + $0x8] sm:$0xff]
  %v17 = vld [vmem:[%s0 + $0x10] sm:$0xff]
  %v18 = vld [vmem:[%s0 + $0x18] sm:$0xff]
  %v19 = vld [vmem:[%s0 + $0x20] sm:$0xff]
  %v20 = vld [vmem:[%s0 + $0x28] sm:$0xff]
  %v21 = vld [vmem:[%s0 + $0x30] sm:$0xff]
  %v22 = vld [vmem:[%s0 + $0x38] sm:$0xff]
  %v23 = vld [vmem:[%s0 + $0x40] sm:$0xff]
  %v24 = vld [vmem:[%s0 + $0x48] sm:$0xff]
  %v25 = vld [vmem:[%s0 + $0x50] sm:$0xff]
  %v26 = vld [vmem:[%s0 + $0x58] sm:$0xff]
  %v27 = vld [vmem:[%s0 + $0x60] sm:$0xff]
  %v28 = vld [vmem:[%s0 + $0x68] sm:$0xff]
  %v29 = vld [vmem:[%s0 + $0x70] sm:$0xff]
  %v30 = vld [vmem:[%s0 + $0x78] sm:$0xff]
  %v31 = vld [vmem:[%s0 + $0x80] sm:$0xff]
  %v32 = vld [vmem:[%s0 + $0x88] sm:$0xff]
  %v33 = vld [vmem:[%s0 + $0x90] sm:$0xff]
  %v34 = vld [vmem:[%s0 + $0x98] sm:$0xff]
  %v35 = vld [vmem:[%s0 + $0xa0] sm:$0xff]
  %v36 = vld [vmem:[%s0 + $0xa8] sm:$0xff]
  %v37 = vld [vmem:[%s0 + $0xb0] sm:$0xff]
  %v38 = vld [vmem:[%s0 + $0xb8] sm:$0xff]
  %v39 = vld [vmem:[%s0 + $0xc0] sm:$0xff]
  %v40 = vld [vmem:[%s0 + $0xc8] sm:$0xff]
  %v41 = vld [vmem:[%s0 + $0xd0] sm:$0xff]
  %v42 = vld [vmem:[%s0 + $0xd8] sm:$0xff]
  %v43 = vld [vmem:[%s0 + $0xe0] sm:$0xff]
  %v44 = vld [vmem:[%s0 + $0xe8] sm:$0xff]
  %v45 = vld [vmem:[%s0 + $0xf0] sm:$0xff]
  %v46 = vld [vmem:[%s0 + $0xf8] sm:$0xff]
  %v47 = vld [vmem:[%s0 + $0x100] sm:$0xff]
  %v48 = vld [vmem:[%s0 + $0x108] sm:$0xff]
  %v49 = vld [vmem:[%s0 + $0x110] sm:$0xff]
  %v50 = vld [vmem:[%s0 + $0x118] sm:$0xff]
  %v51 = vld [vmem:[%s0 + $0x120] sm:$0xff]
  %v52 = vld [vmem:[%s0 + $0x128] sm:$0xff]
  %v53 = vld [vmem:[%s0 + $0x130] sm:$0xff]
  %v54 = vld [vmem:[%s0 + $0x138] sm:$0xff]
  %v55 = vld [vmem:[%s0 + $0x140] sm:$0xff]
  %v56 = vld [vmem:[%s0 + $0x148] sm:$0xff]
  %v57 = vld [vmem:[%s0 + $0x150] sm:$0xff]
  %v58 = vld [vmem:[%s0 + $0x158] sm:$0xff]
  %v59 = vld [vmem:[%s0 + $0x160] sm:$0xff]
  %v60 = vld [vmem:[%s0 + $0x168] sm:$0xff]
  %v61 = vld [vmem:[%s0 + $0x170] sm:$0xff]
  %v62 = vld [vmem:[%s0 + $0x178] sm:$0xff]
  %v63 = vld [vmem:[%s0 + $0x180] sm:$0xff]
  %v64 = vld [vmem:[%s0 + $0x188] sm:$0xff]
  %v65 = vld [vmem:[%s0 + $0x190] sm:$0xff]
  %v66 = vld [vmem:[%s0 + $0x198] sm:$0xff]
  %v67 = vld [vmem:[%s0 + $0x1a0] sm:$0xff]
  %v68 = vld [vmem:[%s0 + $0x1a8] sm:$0xff]
  %v69 = vld [vmem:[%s0 + $0x1b0] sm:$0xff]
  %v70 = vld [vmem:[%s0 + $0x1b8] sm:$0xff]
  %v71 = vld [vmem:[%s0 + $0x1c0] sm:$0xff]
  %v72 = vld [vmem:[%s0 + $0x1c8] sm:$0xff]
  %v73 = vld [vmem:[%s0 + $0x1d0] sm:$0xff]
  %v74 = vld [vmem:[%s0 + $0x1d8] sm:$0xff]
  %v75 = vld [vmem:[%s0 + $0x1e0] sm:$0xff]
  %v76 = vld [vmem:[%s0 + $0x1e8] sm:$0xff]
  %v77 = vld [vmem:[%s0 + $0x1f0] sm:$0xff]
  %v78 = vld [vmem:[%s0 + $0x1f8] sm:$0xff]
  %v79 = vld [vmem:[%s0 + $0x200] sm:$0xff]
  %v80 = vld [vmem:[%s0 + $0x208] sm:$0xff]
  %v81 = vld [vmem:[%s0 + $0x210] sm:$0xff]
  %v82 = vld [vmem:[%s0 + $0x218] sm:$0xff]
  %v83 = vld [vmem:[%s0 + $0x220] sm:$0xff]
  %v84 = vld [vmem:[%s0 + $0x228] sm:$0xff]
  %v85 = vld [vmem:[%s0 + $0x230] sm:$0xff]
  %v86 = vld [vmem:[%s0 + $0x238] sm:$0xff]
  %v87 = vld [vmem:[%s0 + $0x240] sm:$0xff]
  %v88 = vld [vmem:[%s0 + $0x248] sm:$0xff]
  %v89 = vld [vmem:[%s0 + $0x250] sm:$0xff]
  %v90 = vld [vmem:[%s0 + $0x258] sm:$0xff]
  %v91 = vld [vmem:[%s0 + $0x260] sm:$0xff]
  %v92 = vld [vmem:[%s0 + $0x268] sm:$0xff]
  %v93 = vld [vmem:[%s0 + $0x270] sm:$0xff]
  %v94 = vld [vmem:[%s0 + $0x278] sm:$0xff]
  %v95 = vld [vmem:[%s0 + $0x280] sm:$0xff]
  %v96 = vld [vmem:[%s0 + $0x288] sm:$0xff]
  %v97 = vld [vmem:[%s0 + $0x290] sm:$0xff]
  %v98 = vld [vmem:[%s0 + $0x298] sm:$0xff]
  %v99 = vld [vmem:[%s0 + $0x2a0] sm:$0xff]
  %v100 = vld [vmem:[%s0 + $0x2a8] sm:$0xff]
  %v101 = vld [vmem:[%s0 + $0x2b0] sm:$0xff]
  %v102 = vld [vmem:[%s0 + $0x2b8] sm:$0xff]
  %v103 = vld [vmem:[%s0 + $0x2c0] sm:$0xff]
  %v104 = vld [vmem:[%s0 + $0x2c8] sm:$0xff]
  %v105 = vld [vmem:[%s0 + $0x2d0] sm:$0xff]
  %v106 = vld [vmem:[%s0 + $0x2d8] sm:$0xff]
  %v107 = vld [vmem:[%s0 + $0x2e0] sm:$0xff]
  %v108 = vld [vmem:[%s0 + $0x2e8] sm:$0xff]
  %v109 = vld [vmem:[%s0 + $0x2f0] sm:$0xff]
  %v110 = vld [vmem:[%s0 + $0x2f8] sm:$0xff]
  %v111 = vld [vmem:[%s0 + $0x300] sm:$0xff]
  %v112 = vld [vmem:[%s0 + $0x308] sm:$0xff]
  %v113 = vld [vmem:[%s0 + $0x310] sm:$0xff]
  %v114 = vld [vmem:[%s0 + $0x318] sm:$0xff]
  %v115 = vld [vmem:[%s0 + $0x320] sm:$0xff]
  %v116 = vld [vmem:[%s0 + $0x328] sm:$0xff]
  %v117 = vld [vmem:[%s0 + $0x330] sm:$0xff]
  %v118 = vld [vmem:[%s0 + $0x338] sm:$0xff]
  %v119 = vld [vmem:[%s0 + $0x340] sm:$0xff]
  %v120 = vld [vmem:[%s0 + $0x348] sm:$0xff]
  %v121 = vld [vmem:[%s0 + $0x350] sm:$0xff]
  %v122 = vld [vmem:[%s0 + $0x358] sm:$0xff]
  %v123 = vld [vmem:[%s0 + $0x360] sm:$0xff]
  %v124 = vld [vmem:[%s0 + $0x368] sm:$0xff]
  %v125 = vld [vmem:[%s0 + $0x370] sm:$0xff]
  %v126 = vld [vmem:[%s0 + $0x378] sm:$0xff]
  %v127 = vld [vmem:[%s1] sm:$0xf]
  %v128 = vld [vmem:[%s1 + $0x4] sm:$0xf]
  %v129 = vld [vmem:[%s1 + $0x8] sm:$0xf]
  %v130 = vld [vmem:[%s1 + $0xc] sm:$0xf]
  %v131 = vld [vmem:[%s1 + $0x10] sm:$0xf]
  %v132 = vld [vmem:[%s1 + $0x14] sm:$0xf]
  %v133 = vld [vmem:[%s1 + $0x18] sm:$0xf]
  %v134 = vld [vmem:[%s1 + $0x1c] sm:$0xf]
  %v135 = vld [vmem:[%s1 + $0x20] sm:$0xf]
  %v136 = vld [vmem:[%s1 + $0x24] sm:$0xf]
  %v137 = vld [vmem:[%s1 + $0x28] sm:$0xf]
  %v138 = vld [vmem:[%s1 + $0x2c] sm:$0xf]
  %v139 = vld [vmem:[%s1 + $0x30] sm:$0xf]
  %v140 = vld [vmem:[%s1 + $0x34] sm:$0xf]
  %v141 = vld [vmem:[%s1 + $0x38] sm:$0xf]
  %v142 = vld [vmem:[%s1 + $0x3c] sm:$0xf]
  %v143 = vld [vmem:[%s1 + $0x40] sm:$0xf]
  %v144 = vld [vmem:[%s1 + $0x44] sm:$0xf]
  %v145 = vld [vmem:[%s1 + $0x48] sm:$0xf]
  %v146 = vld [vmem:[%s1 + $0x4c] sm:$0xf]
  %v147 = vld [vmem:[%s1 + $0x50] sm:$0xf]
  %v148 = vld [vmem:[%s1 + $0x54] sm:$0xf]
  %v149 = vld [vmem:[%s1 + $0x58] sm:$0xf]
  %v150 = vld [vmem:[%s1 + $0x5c] sm:$0xf]
  %v151 = vld [vmem:[%s1 + $0x60] sm:$0xf]
  %v152 = vld [vmem:[%s1 + $0x64] sm:$0xf]
  %v153 = vld [vmem:[%s1 + $0x68] sm:$0xf]
  %v154 = vld [vmem:[%s1 + $0x6c] sm:$0xf]
  %v155 = vld [vmem:[%s1 + $0x70] sm:$0xf]
  %v156 = vld [vmem:[%s1 + $0x74] sm:$0xf]
  %v157 = vld [vmem:[%s1 + $0x78] sm:$0xf]
  %v158 = vld [vmem:[%s1 + $0x7c] sm:$0xf]
  %v159 = vld [vmem:[%s1 + $0x80] sm:$0xf]
  %v160 = vld [vmem:[%s1 + $0x84] sm:$0xf]
  %v161 = vld [vmem:[%s1 + $0x88] sm:$0xf]
  %v162 = vld [vmem:[%s1 + $0x8c] sm:$0xf]
  %v163 = vld [vmem:[%s1 + $0x90] sm:$0xf]
  %v164 = vld [vmem:[%s1 + $0x94] sm:$0xf]
  %v165 = vld [vmem:[%s1 + $0x98] sm:$0xf]
  %v166 = vld [vmem:[%s1 + $0x9c] sm:$0xf]
  %v167 = vld [vmem:[%s1 + $0xa0] sm:$0xf]
  %v168 = vld [vmem:[%s1 + $0xa4] sm:$0xf]
  %v169 = vld [vmem:[%s1 + $0xa8] sm:$0xf]
  %v170 = vld [vmem:[%s1 + $0xac] sm:$0xf]
  %v171 = vld [vmem:[%s1 + $0xb0] sm:$0xf]
  %v172 = vld [vmem:[%s1 + $0xb4] sm:$0xf]
  %v173 = vld [vmem:[%s1 + $0xb8] sm:$0xf]
  %v174 = vld [vmem:[%s1 + $0xbc] sm:$0xf]
  %v175 = vld [vmem:[%s1 + $0xc0] sm:$0xf]
  %v176 = vld [vmem:[%s1 + $0xc4] sm:$0xf]
  %v177 = vld [vmem:[%s1 + $0xc8] sm:$0xf]
  %v178 = vld [vmem:[%s1 + $0xcc] sm:$0xf]
  %v179 = vld [vmem:[%s1 + $0xd0] sm:$0xf]
  %v180 = vld [vmem:[%s1 + $0xd4] sm:$0xf]
  %v181 = vld [vmem:[%s1 + $0xd8] sm:$0xf]
  %v182 = vld [vmem:[%s1 + $0xdc] sm:$0xf]
  %v183 = vld [vmem:[%s1 + $0xe0] sm:$0xf]
  %v184 = vld [vmem:[%s1 + $0xe4] sm:$0xf]
  %v185 = vld [vmem:[%s1 + $0xe8] sm:$0xf]
  %v186 = vld [vmem:[%s1 + $0xec] sm:$0xf]
  %v187 = vld [vmem:[%s1 + $0xf0] sm:$0xf]
  %v188 = vld [vmem:[%s1 + $0xf4] sm:$0xf]
  %v189 = vld [vmem:[%s1 + $0xf8] sm:$0xf]
  %v190 = vld [vmem:[%s1 + $0xfc] sm:$0xf]
  %v191 = vld [vmem:[%s1 + $0x100] sm:$0xf]
  %v192 = vld [vmem:[%s1 + $0x104] sm:$0xf]
  %v193 = vld [vmem:[%s1 + $0x108] sm:$0xf]
  %v194 = vld [vmem:[%s1 + $0x10c] sm:$0xf]
  %v195 = vld [vmem:[%s1 + $0x110] sm:$0xf]
  %v196 = vld [vmem:[%s1 + $0x114] sm:$0xf]
  %v197 = vld [vmem:[%s1 + $0x118] sm:$0xf]
  %v198 = vld [vmem:[%s1 + $0x11c] sm:$0xf]
  %v199 = vld [vmem:[%s1 + $0x120] sm:$0xf]
  %v200 = vld [vmem:[%s1 + $0x124] sm:$0xf]
  %v201 = vld [vmem:[%s1 + $0x128] sm:$0xf]
  %v202 = vld [vmem:[%s1 + $0x12c] sm:$0xf]
  %v203 = vld [vmem:[%s1 + $0x130] sm:$0xf]
  %v204 = vld [vmem:[%s1 + $0x134] sm:$0xf]
  %v205 = vld [vmem:[%s1 + $0x138] sm:$0xf]
  %v206 = vld [vmem:[%s1 + $0x13c] sm:$0xf]
  %v207 = vld [vmem:[%s1 + $0x140] sm:$0xf]
  %v208 = vld [vmem:[%s1 + $0x144] sm:$0xf]
  %v209 = vld [vmem:[%s1 + $0x148] sm:$0xf]
  %v210 = vld [vmem:[%s1 + $0x14c] sm:$0xf]
  %v211 = vld [vmem:[%s1 + $0x150] sm:$0xf]
  %v212 = vld [vmem:[%s1 + $0x154] sm:$0xf]
  %v213 = vld [vmem:[%s1 + $0x158] sm:$0xf]
  %v214 = vld [vmem:[%s1 + $0x15c] sm:$0xf]
  %v215 = vld [vmem:[%s1 + $0x160] sm:$0xf]
  %v216 = vld [vmem:[%s1 + $0x164] sm:$0xf]
  %v217 = vld [vmem:[%s1 + $0x168] sm:$0xf]
  %v218 = vld [vmem:[%s1 + $0x16c] sm:$0xf]
  %v219 = vld [vmem:[%s1 + $0x170] sm:$0xf]
  %v220 = vld [vmem:[%s1 + $0x174] sm:$0xf]
  %v221 = vld [vmem:[%s1 + $0x178] sm:$0xf]
  %v222 = vld [vmem:[%s1 + $0x17c] sm:$0xf]
  %v223 = vld [vmem:[%s1 + $0x180] sm:$0xf]
  %v224 = vld [vmem:[%s1 + $0x184] sm:$0xf]
  %v225 = vld [vmem:[%s1 + $0x188] sm:$0xf]
  %v226 = vld [vmem:[%s1 + $0x18c] sm:$0xf]
  %v227 = vld [vmem:[%s1 + $0x190] sm:$0xf]
  %v228 = vld [vmem:[%s1 + $0x194] sm:$0xf]
  %v229 = vld [vmem:[%s1 + $0x198] sm:$0xf]
  %v230 = vld [vmem:[%s1 + $0x19c] sm:$0xf]
  %v231 = vld [vmem:[%s1 + $0x1a0] sm:$0xf]
  %v232 = vld [vmem:[%s1 + $0x1a4] sm:$0xf]
  %v233 = vld [vmem:[%s1 + $0x1a8] sm:$0xf]
  %v234 = vld [vmem:[%s1 + $0x1ac] sm:$0xf]
  %v235 = vld [vmem:[%s1 + $0x1b0] sm:$0xf]
  %v236 = vld [vmem:[%s1 + $0x1b4] sm:$0xf]
  %v237 = vld [vmem:[%s1 + $0x1b8] sm:$0xf]
  %v238 = vld [vmem:[%s1 + $0x1bc] sm:$0xf]
  %v239 = vld [vmem:[%s1 + $0x1c0] sm:$0xf]
  %v240 = vld [vmem:[%s1 + $0x1c4] sm:$0xf]
  %v241 = vld [vmem:[%s1 + $0x1c8] sm:$0xf]
  %v242 = vld [vmem:[%s1 + $0x1cc] sm:$0xf]
  %v243 = vld [vmem:[%s1 + $0x1d0] sm:$0xf]
  %v244 = vld [vmem:[%s1 + $0x1d4] sm:$0xf]
  %v245 = vld [vmem:[%s1 + $0x1d8] sm:$0xf]
  %v246 = vld [vmem:[%s1 + $0x1dc] sm:$0xf]
  %v247 = vld [vmem:[%s1 + $0x1e0] sm:$0xf]
  %v248 = vld [vmem:[%s1 + $0x1e4] sm:$0xf]
  %v249 = vld [vmem:[%s1 + $0x1e8] sm:$0xf]
  %v250 = vld [vmem:[%s1 + $0x1ec] sm:$0xf]
  %v251 = vld [vmem:[%s1 + $0x1f0] sm:$0xf]
  %v252 = vld [vmem:[%s1 + $0x1f4] sm:$0xf]
  %v253 = vld [vmem:[%s1 + $0x1f8] sm:$0xf]
  %v254 = vld [vmem:[%s1 + $0x1fc] sm:$0xf]
  %v255 = vld [vmem:[%s1 + $0x200] sm:$0xf]
  %v256 = vld [vmem:[%s1 + $0x204] sm:$0xf]
  %v257 = vld [vmem:[%s1 + $0x208] sm:$0xf]
  %v258 = vld [vmem:[%s1 + $0x20c] sm:$0xf]
  %v259 = vld [vmem:[%s1 + $0x210] sm:$0xf]
  %v260 = vld [vmem:[%s1 + $0x214] sm:$0xf]
  %v261 = vld [vmem:[%s1 + $0x218] sm:$0xf]
  %v262 = vld [vmem:[%s1 + $0x21c] sm:$0xf]
  %v263 = vld [vmem:[%s1 + $0x220] sm:$0xf]
  %v264 = vld [vmem:[%s1 + $0x224] sm:$0xf]
  %v265 = vld [vmem:[%s1 + $0x228] sm:$0xf]
  %v266 = vld [vmem:[%s1 + $0x22c] sm:$0xf]
  %v267 = vld [vmem:[%s1 + $0x230] sm:$0xf]
  %v268 = vld [vmem:[%s1 + $0x234] sm:$0xf]
  %v269 = vld [vmem:[%s1 + $0x238] sm:$0xf]
  %v270 = vld [vmem:[%s1 + $0x23c] sm:$0xf]
  %v271 = vld [vmem:[%s1 + $0x240] sm:$0xf]
  %v272 = vld [vmem:[%s1 + $0x244] sm:$0xf]
  %v273 = vld [vmem:[%s1 + $0x248] sm:$0xf]
  %v274 = vld [vmem:[%s1 + $0x24c] sm:$0xf]
  %v275 = vld [vmem:[%s1 + $0x250] sm:$0xf]
  %v276 = vld [vmem:[%s1 + $0x254] sm:$0xf]
  %v277 = vld [vmem:[%s1 + $0x258] sm:$0xf]
  %v278 = vld [vmem:[%s1 + $0x25c] sm:$0xf]
  %v279 = vld [vmem:[%s1 + $0x260] sm:$0xf]
  %v280 = vld [vmem:[%s1 + $0x264] sm:$0xf]
  %v281 = vld [vmem:[%s1 + $0x268] sm:$0xf]
  %v282 = vld [vmem:[%s1 + $0x26c] sm:$0xf]
  %v283 = vld [vmem:[%s1 + $0x270] sm:$0xf]
  %v284 = vld [vmem:[%s1 + $0x274] sm:$0xf]
  %v285 = vld [vmem:[%s1 + $0x278] sm:$0xf]
  %v286 = vld [vmem:[%s1 + $0x27c] sm:$0xf]
  %v287 = vld [vmem:[%s1 + $0x280] sm:$0xf]
  %v288 = vld [vmem:[%s1 + $0x284] sm:$0xf]
  %v289 = vld [vmem:[%s1 + $0x288] sm:$0xf]
  %v290 = vld [vmem:[%s1 + $0x28c] sm:$0xf]
  %v291 = vld [vmem:[%s1 + $0x290] sm:$0xf]
  %v292 = vld [vmem:[%s1 + $0x294] sm:$0xf]
  %v293 = vld [vmem:[%s1 + $0x298] sm:$0xf]
  %v294 = vld [vmem:[%s1 + $0x29c] sm:$0xf]
  %v295 = vld [vmem:[%s1 + $0x2a0] sm:$0xf]
  %v296 = vld [vmem:[%s1 + $0x2a4] sm:$0xf]
  %v297 = vld [vmem:[%s1 + $0x2a8] sm:$0xf]
  %v298 = vld [vmem:[%s1 + $0x2ac] sm:$0xf]
  %v299 = vld [vmem:[%s1 + $0x2b0] sm:$0xf]
  %v300 = vld [vmem:[%s1 + $0x2b4] sm:$0xf]
  %v301 = vld [vmem:[%s1 + $0x2b8] sm:$0xf]
  %v302 = vld [vmem:[%s1 + $0x2bc] sm:$0xf]
  %v303 = vld [vmem:[%s1 + $0x2c0] sm:$0xf]
  %v304 = vld [vmem:[%s1 + $0x2c4] sm:$0xf]
  %v305 = vld [vmem:[%s1 + $0x2c8] sm:$0xf]
  %v306 = vld [vmem:[%s1 + $0x2cc] sm:$0xf]
  %v307 = vld [vmem:[%s1 + $0x2d0] sm:$0xf]
  %v308 = vld [vmem:[%s1 + $0x2d4] sm:$0xf]
  %v309 = vld [vmem:[%s1 + $0x2d8] sm:$0xf]
  %v310 = vld [vmem:[%s1 + $0x2dc] sm:$0xf]
  %v311 = vld [vmem:[%s1 + $0x2e0] sm:$0xf]
  %v312 = vld [vmem:[%s1 + $0x2e4] sm:$0xf]
  %v313 = vld [vmem:[%s1 + $0x2e8] sm:$0xf]
  %v314 = vld [vmem:[%s1 + $0x2ec] sm:$0xf]
  %v315 = vld [vmem:[%s1 + $0x2f0] sm:$0xf]
  %v316 = vld [vmem:[%s1 + $0x2f4] sm:$0xf]
  %v317 = vld [vmem:[%s1 + $0x2f8] sm:$0xf]
  %v318 = vld [vmem:[%s1 + $0x2fc] sm:$0xf]
  %v319 = vld [vmem:[%s1 + $0x300] sm:$0xf]
  %v320 = vld [vmem:[%s1 + $0x304] sm:$0xf]
  %v321 = vld [vmem:[%s1 + $0x308] sm:$0xf]
  %v322 = vld [vmem:[%s1 + $0x30c] sm:$0xf]
  %v323 = vld [vmem:[%s1 + $0x310] sm:$0xf]
  %v324 = vld [vmem:[%s1 + $0x314] sm:$0xf]
  %v325 = vld [vmem:[%s1 + $0x318] sm:$0xf]
  %v326 = vld [vmem:[%s1 + $0x31c] sm:$0xf]
  %v327 = vld [vmem:[%s1 + $0x320] sm:$0xf]
  %v328 = vld [vmem:[%s1 + $0x324] sm:$0xf]
  %v329 = vld [vmem:[%s1 + $0x328] sm:$0xf]
  %v330 = vld [vmem:[%s1 + $0x32c] sm:$0xf]
  %v331 = vld [vmem:[%s1 + $0x330] sm:$0xf]
  %v332 = vld [vmem:[%s1 + $0x334] sm:$0xf]
  %v333 = vld [vmem:[%s1 + $0x338] sm:$0xf]
  %v334 = vld [vmem:[%s1 + $0x33c] sm:$0xf]
  %v335 = vld [vmem:[%s1 + $0x340] sm:$0xf]
  %v336 = vld [vmem:[%s1 + $0x344] sm:$0xf]
  %v337 = vld [vmem:[%s1 + $0x348] sm:$0xf]
  %v338 = vld [vmem:[%s1 + $0x34c] sm:$0xf]
  %v339 = vld [vmem:[%s1 + $0x350] sm:$0xf]
  %v340 = vld [vmem:[%s1 + $0x354] sm:$0xf]
  %v341 = vld [vmem:[%s1 + $0x358] sm:$0xf]
  %v342 = vld [vmem:[%s1 + $0x35c] sm:$0xf]
  %v343 = vld [vmem:[%s1 + $0x360] sm:$0xf]
  %v344 = vld [vmem:[%s1 + $0x364] sm:$0xf]
  %v345 = vld [vmem:[%s1 + $0x368] sm:$0xf]
  %v346 = vld [vmem:[%s1 + $0x36c] sm:$0xf]
  %v347 = vld [vmem:[%s1 + $0x370] sm:$0xf]
  %v348 = vld [vmem:[%s1 + $0x374] sm:$0xf]
  %v349 = vld [vmem:[%s1 + $0x378] sm:$0xf]
  %v350 = vld [vmem:[%s1 + $0x37c] sm:$0xf]
  %v351 = vld [vmem:[%s2] sm:$0x1]
  %v353 = vlaneseq
  %v354 = vshrl.u32 %v353, 7
  %v355 = vsub.s32 0, %v354
  %v356 = vrot.slane %v351, %v355
  %v470 = vunpack.c.l.b16 %v15
  %v471 = vunpack.c.h.b16 %v15
  %v472 = vunpack.c.l.b16 %v16
  %v473 = vunpack.c.h.b16 %v16
  %v474 = vunpack.c.l.b16 %v17
  %v475 = vunpack.c.h.b16 %v17
  %v476 = vunpack.c.l.b16 %v18
  %v477 = vunpack.c.h.b16 %v18
  %v478 = vunpack.c.l.b16 %v19
  %v479 = vunpack.c.h.b16 %v19
  %v480 = vunpack.c.l.b16 %v20
  %v481 = vunpack.c.h.b16 %v20
  %v482 = vunpack.c.l.b16 %v21
  %v483 = vunpack.c.h.b16 %v21
  %v484 = vunpack.c.l.b16 %v22
  %v485 = vunpack.c.h.b16 %v22
  %v486 = vunpack.c.l.b16 %v23
  %v487 = vunpack.c.h.b16 %v23
  %v488 = vunpack.c.l.b16 %v24
  %v489 = vunpack.c.h.b16 %v24
  %v490 = vunpack.c.l.b16 %v25
  %v491 = vunpack.c.h.b16 %v25
  %v492 = vunpack.c.l.b16 %v26
  %v493 = vunpack.c.h.b16 %v26
  %v494 = vunpack.c.l.b16 %v27
  %v495 = vunpack.c.h.b16 %v27
  %v496 = vunpack.c.l.b16 %v28
  %v497 = vunpack.c.h.b16 %v28
  %v498 = vunpack.c.l.b16 %v29
  %v499 = vunpack.c.h.b16 %v29
  %v500 = vunpack.c.l.b16 %v30
  %v501 = vunpack.c.h.b16 %v30
  %v502 = vunpack.c.l.b16 %v31
  %v503 = vunpack.c.h.b16 %v31
  %v504 = vunpack.c.l.b16 %v32
  %v505 = vunpack.c.h.b16 %v32
  %v506 = vunpack.c.l.b16 %v33
  %v507 = vunpack.c.h.b16 %v33
  %v508 = vunpack.c.l.b16 %v34
  %v509 = vunpack.c.h.b16 %v34
  %v510 = vunpack.c.l.b16 %v35
  %v511 = vunpack.c.h.b16 %v35
  %v512 = vunpack.c.l.b16 %v36
  %v513 = vunpack.c.h.b16 %v36
  %v514 = vunpack.c.l.b16 %v37
  %v515 = vunpack.c.h.b16 %v37
  %v516 = vunpack.c.l.b16 %v38
  %v517 = vunpack.c.h.b16 %v38
  %v518 = vunpack.c.l.b16 %v39
  %v519 = vunpack.c.h.b16 %v39
  %v520 = vunpack.c.l.b16 %v40
  %v521 = vunpack.c.h.b16 %v40
  %v522 = vunpack.c.l.b16 %v41
  %v523 = vunpack.c.h.b16 %v41
  %v524 = vunpack.c.l.b16 %v42
  %v525 = vunpack.c.h.b16 %v42
  %v526 = vunpack.c.l.b16 %v43
  %v527 = vunpack.c.h.b16 %v43
  %v528 = vunpack.c.l.b16 %v44
  %v529 = vunpack.c.h.b16 %v44
  %v530 = vunpack.c.l.b16 %v45
  %v531 = vunpack.c.h.b16 %v45
  %v532 = vunpack.c.l.b16 %v46
  %v533 = vunpack.c.h.b16 %v46
  %v534 = vunpack.c.l.b16 %v47
  %v535 = vunpack.c.h.b16 %v47
  %v536 = vunpack.c.l.b16 %v48
  %v537 = vunpack.c.h.b16 %v48
  %v538 = vunpack.c.l.b16 %v49
  %v539 = vunpack.c.h.b16 %v49
  %v540 = vunpack.c.l.b16 %v50
  %v541 = vunpack.c.h.b16 %v50
  %v542 = vunpack.c.l.b16 %v51
  %v543 = vunpack.c.h.b16 %v51
  %v544 = vunpack.c.l.b16 %v52
  %v545 = vunpack.c.h.b16 %v52
  %v546 = vunpack.c.l.b16 %v53
  %v547 = vunpack.c.h.b16 %v53
  %v548 = vunpack.c.l.b16 %v54
  %v549 = vunpack.c.h.b16 %v54
  %v550 = vunpack.c.l.b16 %v55
  %v551 = vunpack.c.h.b16 %v55
  %v552 = vunpack.c.l.b16 %v56
  %v553 = vunpack.c.h.b16 %v56
  %v554 = vunpack.c.l.b16 %v57
  %v555 = vunpack.c.h.b16 %v57
  %v556 = vunpack.c.l.b16 %v58
  %v557 = vunpack.c.h.b16 %v58
  %v558 = vunpack.c.l.b16 %v59
  %v559 = vunpack.c.h.b16 %v59
  %v560 = vunpack.c.l.b16 %v60
  %v561 = vunpack.c.h.b16 %v60
  %v562 = vunpack.c.l.b16 %v61
  %v563 = vunpack.c.h.b16 %v61
  %v564 = vunpack.c.l.b16 %v62
  %v565 = vunpack.c.h.b16 %v62
  %v566 = vunpack.c.l.b16 %v63
  %v567 = vunpack.c.h.b16 %v63
  %v568 = vunpack.c.l.b16 %v64
  %v569 = vunpack.c.h.b16 %v64
  %v570 = vunpack.c.l.b16 %v65
  %v571 = vunpack.c.h.b16 %v65
  %v572 = vunpack.c.l.b16 %v66
  %v573 = vunpack.c.h.b16 %v66
  %v574 = vunpack.c.l.b16 %v67
  %v575 = vunpack.c.h.b16 %v67
  %v576 = vunpack.c.l.b16 %v68
  %v577 = vunpack.c.h.b16 %v68
  %v578 = vunpack.c.l.b16 %v69
  %v579 = vunpack.c.h.b16 %v69
  %v580 = vunpack.c.l.b16 %v70
  %v581 = vunpack.c.h.b16 %v70
  %v582 = vunpack.c.l.b16 %v71
  %v583 = vunpack.c.h.b16 %v71
  %v584 = vunpack.c.l.b16 %v72
  %v585 = vunpack.c.h.b16 %v72
  %v586 = vunpack.c.l.b16 %v73
  %v587 = vunpack.c.h.b16 %v73
  %v588 = vunpack.c.l.b16 %v74
  %v589 = vunpack.c.h.b16 %v74
  %v590 = vunpack.c.l.b16 %v75
  %v591 = vunpack.c.h.b16 %v75
  %v592 = vunpack.c.l.b16 %v76
  %v593 = vunpack.c.h.b16 %v76
  %v594 = vunpack.c.l.b16 %v77
  %v595 = vunpack.c.h.b16 %v77
  %v596 = vunpack.c.l.b16 %v78
  %v597 = vunpack.c.h.b16 %v78
  %v598 = vunpack.c.l.b16 %v79
  %v599 = vunpack.c.h.b16 %v79
  %v600 = vunpack.c.l.b16 %v80
  %v601 = vunpack.c.h.b16 %v80
  %v602 = vunpack.c.l.b16 %v81
  %v603 = vunpack.c.h.b16 %v81
  %v604 = vunpack.c.l.b16 %v82
  %v605 = vunpack.c.h.b16 %v82
  %v606 = vunpack.c.l.b16 %v83
  %v607 = vunpack.c.h.b16 %v83
  %v608 = vunpack.c.l.b16 %v84
  %v609 = vunpack.c.h.b16 %v84
  %v610 = vunpack.c.l.b16 %v85
  %v611 = vunpack.c.h.b16 %v85
  %v612 = vunpack.c.l.b16 %v86
  %v613 = vunpack.c.h.b16 %v86
  %v614 = vunpack.c.l.b16 %v87
  %v615 = vunpack.c.h.b16 %v87
  %v616 = vunpack.c.l.b16 %v88
  %v617 = vunpack.c.h.b16 %v88
  %v618 = vunpack.c.l.b16 %v89
  %v619 = vunpack.c.h.b16 %v89
  %v620 = vunpack.c.l.b16 %v90
  %v621 = vunpack.c.h.b16 %v90
  %v622 = vunpack.c.l.b16 %v91
  %v623 = vunpack.c.h.b16 %v91
  %v624 = vunpack.c.l.b16 %v92
  %v625 = vunpack.c.h.b16 %v92
  %v626 = vunpack.c.l.b16 %v93
  %v627 = vunpack.c.h.b16 %v93
  %v628 = vunpack.c.l.b16 %v94
  %v629 = vunpack.c.h.b16 %v94
  %v630 = vunpack.c.l.b16 %v95
  %v631 = vunpack.c.h.b16 %v95
  %v632 = vunpack.c.l.b16 %v96
  %v633 = vunpack.c.h.b16 %v96
  %v634 = vunpack.c.l.b16 %v97
  %v635 = vunpack.c.h.b16 %v97
  %v636 = vunpack.c.l.b16 %v98
  %v637 = vunpack.c.h.b16 %v98
  %v638 = vunpack.c.l.b16 %v99
  %v639 = vunpack.c.h.b16 %v99
  %v640 = vunpack.c.l.b16 %v100
  %v641 = vunpack.c.h.b16 %v100
  %v642 = vunpack.c.l.b16 %v101
  %v643 = vunpack.c.h.b16 %v101
  %v644 = vunpack.c.l.b16 %v102
  %v645 = vunpack.c.h.b16 %v102
  %v646 = vunpack.c.l.b16 %v103
  %v647 = vunpack.c.h.b16 %v103
  %v648 = vunpack.c.l.b16 %v104
  %v649 = vunpack.c.h.b16 %v104
  %v650 = vunpack.c.l.b16 %v105
  %v651 = vunpack.c.h.b16 %v105
  %v652 = vunpack.c.l.b16 %v106
  %v653 = vunpack.c.h.b16 %v106
  %v654 = vunpack.c.l.b16 %v107
  %v655 = vunpack.c.h.b16 %v107
  %v656 = vunpack.c.l.b16 %v108
  %v657 = vunpack.c.h.b16 %v108
  %v658 = vunpack.c.l.b16 %v109
  %v659 = vunpack.c.h.b16 %v109
  %v660 = vunpack.c.l.b16 %v110
  %v661 = vunpack.c.h.b16 %v110
  %v662 = vunpack.c.l.b16 %v111
  %v663 = vunpack.c.h.b16 %v111
  %v664 = vunpack.c.l.b16 %v112
  %v665 = vunpack.c.h.b16 %v112
  %v666 = vunpack.c.l.b16 %v113
  %v667 = vunpack.c.h.b16 %v113
  %v668 = vunpack.c.l.b16 %v114
  %v669 = vunpack.c.h.b16 %v114
  %v670 = vunpack.c.l.b16 %v115
  %v671 = vunpack.c.h.b16 %v115
  %v672 = vunpack.c.l.b16 %v116
  %v673 = vunpack.c.h.b16 %v116
  %v674 = vunpack.c.l.b16 %v117
  %v675 = vunpack.c.h.b16 %v117
  %v676 = vunpack.c.l.b16 %v118
  %v677 = vunpack.c.h.b16 %v118
  %v678 = vunpack.c.l.b16 %v119
  %v679 = vunpack.c.h.b16 %v119
  %v680 = vunpack.c.l.b16 %v120
  %v681 = vunpack.c.h.b16 %v120
  %v682 = vunpack.c.l.b16 %v121
  %v683 = vunpack.c.h.b16 %v121
  %v684 = vunpack.c.l.b16 %v122
  %v685 = vunpack.c.h.b16 %v122
  %v686 = vunpack.c.l.b16 %v123
  %v687 = vunpack.c.h.b16 %v123
  %v688 = vunpack.c.l.b16 %v124
  %v689 = vunpack.c.h.b16 %v124
  %v690 = vunpack.c.l.b16 %v125
  %v691 = vunpack.c.h.b16 %v125
  %v692 = vunpack.c.l.b16 %v126
  %v693 = vunpack.c.h.b16 %v126
  %v694 = vpack.c.b16 %v484, %v470
  %v695 = vpack.c.b16 %v485, %v471
  %v696 = vpack.c.b16 %v486, %v472
  %v697 = vpack.c.b16 %v487, %v473
  %v698 = vpack.c.b16 %v488, %v474
  %v699 = vpack.c.b16 %v489, %v475
  %v700 = vpack.c.b16 %v490, %v476
  %v701 = vpack.c.b16 %v491, %v477
  %v702 = vpack.c.b16 %v492, %v478
  %v703 = vpack.c.b16 %v493, %v479
  %v704 = vpack.c.b16 %v494, %v480
  %v705 = vpack.c.b16 %v495, %v481
  %v706 = vpack.c.b16 %v496, %v482
  %v707 = vpack.c.b16 %v497, %v483
  %v708 = vpack.c.b16 %v512, %v498
  %v709 = vpack.c.b16 %v513, %v499
  %v710 = vpack.c.b16 %v514, %v500
  %v711 = vpack.c.b16 %v515, %v501
  %v712 = vpack.c.b16 %v516, %v502
  %v713 = vpack.c.b16 %v517, %v503
  %v714 = vpack.c.b16 %v518, %v504
  %v715 = vpack.c.b16 %v519, %v505
  %v716 = vpack.c.b16 %v520, %v506
  %v717 = vpack.c.b16 %v521, %v507
  %v718 = vpack.c.b16 %v522, %v508
  %v719 = vpack.c.b16 %v523, %v509
  %v720 = vpack.c.b16 %v524, %v510
  %v721 = vpack.c.b16 %v525, %v511
  %v722 = vpack.c.b16 %v540, %v526
  %v723 = vpack.c.b16 %v541, %v527
  %v724 = vpack.c.b16 %v542, %v528
  %v725 = vpack.c.b16 %v543, %v529
  %v726 = vpack.c.b16 %v544, %v530
  %v727 = vpack.c.b16 %v545, %v531
  %v728 = vpack.c.b16 %v546, %v532
  %v729 = vpack.c.b16 %v547, %v533
  %v730 = vpack.c.b16 %v548, %v534
  %v731 = vpack.c.b16 %v549, %v535
  %v732 = vpack.c.b16 %v550, %v536
  %v733 = vpack.c.b16 %v551, %v537
  %v734 = vpack.c.b16 %v552, %v538
  %v735 = vpack.c.b16 %v553, %v539
  %v736 = vpack.c.b16 %v568, %v554
  %v737 = vpack.c.b16 %v569, %v555
  %v738 = vpack.c.b16 %v570, %v556
  %v739 = vpack.c.b16 %v571, %v557
  %v740 = vpack.c.b16 %v572, %v558
  %v741 = vpack.c.b16 %v573, %v559
  %v742 = vpack.c.b16 %v574, %v560
  %v743 = vpack.c.b16 %v575, %v561
  %v744 = vpack.c.b16 %v576, %v562
  %v745 = vpack.c.b16 %v577, %v563
  %v746 = vpack.c.b16 %v578, %v564
  %v747 = vpack.c.b16 %v579, %v565
  %v748 = vpack.c.b16 %v580, %v566
  %v749 = vpack.c.b16 %v581, %v567
  %v750 = vpack.c.b16 %v596, %v582
  %v751 = vpack.c.b16 %v597, %v583
  %v752 = vpack.c.b16 %v598, %v584
  %v753 = vpack.c.b16 %v599, %v585
  %v754 = vpack.c.b16 %v600, %v586
  %v755 = vpack.c.b16 %v601, %v587
  %v756 = vpack.c.b16 %v602, %v588
  %v757 = vpack.c.b16 %v603, %v589
  %v758 = vpack.c.b16 %v604, %v590
  %v759 = vpack.c.b16 %v605, %v591
  %v760 = vpack.c.b16 %v606, %v592
  %v761 = vpack.c.b16 %v607, %v593
  %v762 = vpack.c.b16 %v608, %v594
  %v763 = vpack.c.b16 %v609, %v595
  %v764 = vpack.c.b16 %v624, %v610
  %v765 = vpack.c.b16 %v625, %v611
  %v766 = vpack.c.b16 %v626, %v612
  %v767 = vpack.c.b16 %v627, %v613
  %v768 = vpack.c.b16 %v628, %v614
  %v769 = vpack.c.b16 %v629, %v615
  %v770 = vpack.c.b16 %v630, %v616
  %v771 = vpack.c.b16 %v631, %v617
  %v772 = vpack.c.b16 %v632, %v618
  %v773 = vpack.c.b16 %v633, %v619
  %v774 = vpack.c.b16 %v634, %v620
  %v775 = vpack.c.b16 %v635, %v621
  %v776 = vpack.c.b16 %v636, %v622
  %v777 = vpack.c.b16 %v637, %v623
  %v778 = vpack.c.b16 %v652, %v638
  %v779 = vpack.c.b16 %v653, %v639
  %v780 = vpack.c.b16 %v654, %v640
  %v781 = vpack.c.b16 %v655, %v641
  %v782 = vpack.c.b16 %v656, %v642
  %v783 = vpack.c.b16 %v657, %v643
  %v784 = vpack.c.b16 %v658, %v644
  %v785 = vpack.c.b16 %v659, %v645
  %v786 = vpack.c.b16 %v660, %v646
  %v787 = vpack.c.b16 %v661, %v647
  %v788 = vpack.c.b16 %v662, %v648
  %v789 = vpack.c.b16 %v663, %v649
  %v790 = vpack.c.b16 %v664, %v650
  %v791 = vpack.c.b16 %v665, %v651
  %v792 = vpack.c.b16 %v680, %v666
  %v793 = vpack.c.b16 %v681, %v667
  %v794 = vpack.c.b16 %v682, %v668
  %v795 = vpack.c.b16 %v683, %v669
  %v796 = vpack.c.b16 %v684, %v670
  %v797 = vpack.c.b16 %v685, %v671
  %v798 = vpack.c.b16 %v686, %v672
  %v799 = vpack.c.b16 %v687, %v673
  %v800 = vpack.c.b16 %v688, %v674
  %v801 = vpack.c.b16 %v689, %v675
  %v802 = vpack.c.b16 %v690, %v676
  %v803 = vpack.c.b16 %v691, %v677
  %v804 = vpack.c.b16 %v692, %v678
  %v805 = vpack.c.b16 %v693, %v679
  %v1142 = vunpack.c.l.b16 %v127
  %v1143 = vunpack.c.l.b16 %v128
  %v1144 = vunpack.c.l.b16 %v129
  %v1145 = vunpack.c.l.b16 %v130
  %v1146 = vunpack.c.l.b16 %v131
  %v1147 = vunpack.c.l.b16 %v132
  %v1148 = vunpack.c.l.b16 %v133
  %v1149 = vunpack.c.l.b16 %v134
  %v1150 = vunpack.c.l.b16 %v135
  %v1151 = vunpack.c.l.b16 %v136
  %v1152 = vunpack.c.l.b16 %v137
  %v1153 = vunpack.c.l.b16 %v138
  %v1154 = vunpack.c.l.b16 %v139
  %v1155 = vunpack.c.l.b16 %v140
  %v1156 = vunpack.c.l.b16 %v141
  %v1157 = vunpack.c.l.b16 %v142
  %v1158 = vunpack.c.l.b16 %v143
  %v1159 = vunpack.c.l.b16 %v144
  %v1160 = vunpack.c.l.b16 %v145
  %v1161 = vunpack.c.l.b16 %v146
  %v1162 = vunpack.c.l.b16 %v147
  %v1163 = vunpack.c.l.b16 %v148
  %v1164 = vunpack.c.l.b16 %v149
  %v1165 = vunpack.c.l.b16 %v150
  %v1166 = vunpack.c.l.b16 %v151
  %v1167 = vunpack.c.l.b16 %v152
  %v1168 = vunpack.c.l.b16 %v153
  %v1169 = vunpack.c.l.b16 %v154
  %v1170 = vunpack.c.l.b16 %v155
  %v1171 = vunpack.c.l.b16 %v156
  %v1172 = vunpack.c.l.b16 %v157
  %v1173 = vunpack.c.l.b16 %v158
  %v1174 = vunpack.c.l.b16 %v159
  %v1175 = vunpack.c.l.b16 %v160
  %v1176 = vunpack.c.l.b16 %v161
  %v1177 = vunpack.c.l.b16 %v162
  %v1178 = vunpack.c.l.b16 %v163
  %v1179 = vunpack.c.l.b16 %v164
  %v1180 = vunpack.c.l.b16 %v165
  %v1181 = vunpack.c.l.b16 %v166
  %v1182 = vunpack.c.l.b16 %v167
  %v1183 = vunpack.c.l.b16 %v168
  %v1184 = vunpack.c.l.b16 %v169
  %v1185 = vunpack.c.l.b16 %v170
  %v1186 = vunpack.c.l.b16 %v171
  %v1187 = vunpack.c.l.b16 %v172
  %v1188 = vunpack.c.l.b16 %v173
  %v1189 = vunpack.c.l.b16 %v174
  %v1190 = vunpack.c.l.b16 %v175
  %v1191 = vunpack.c.l.b16 %v176
  %v1192 = vunpack.c.l.b16 %v177
  %v1193 = vunpack.c.l.b16 %v178
  %v1194 = vunpack.c.l.b16 %v179
  %v1195 = vunpack.c.l.b16 %v180
  %v1196 = vunpack.c.l.b16 %v181
  %v1197 = vunpack.c.l.b16 %v182
  %v1198 = vunpack.c.l.b16 %v183
  %v1199 = vunpack.c.l.b16 %v184
  %v1200 = vunpack.c.l.b16 %v185
  %v1201 = vunpack.c.l.b16 %v186
  %v1202 = vunpack.c.l.b16 %v187
  %v1203 = vunpack.c.l.b16 %v188
  %v1204 = vunpack.c.l.b16 %v189
  %v1205 = vunpack.c.l.b16 %v190
  %v1206 = vunpack.c.l.b16 %v191
  %v1207 = vunpack.c.l.b16 %v192
  %v1208 = vunpack.c.l.b16 %v193
  %v1209 = vunpack.c.l.b16 %v194
  %v1210 = vunpack.c.l.b16 %v195
  %v1211 = vunpack.c.l.b16 %v196
  %v1212 = vunpack.c.l.b16 %v197
  %v1213 = vunpack.c.l.b16 %v198
  %v1214 = vunpack.c.l.b16 %v199
  %v1215 = vunpack.c.l.b16 %v200
  %v1216 = vunpack.c.l.b16 %v201
  %v1217 = vunpack.c.l.b16 %v202
  %v1218 = vunpack.c.l.b16 %v203
  %v1219 = vunpack.c.l.b16 %v204
  %v1220 = vunpack.c.l.b16 %v205
  %v1221 = vunpack.c.l.b16 %v206
  %v1222 = vunpack.c.l.b16 %v207
  %v1223 = vunpack.c.l.b16 %v208
  %v1224 = vunpack.c.l.b16 %v209
  %v1225 = vunpack.c.l.b16 %v210
  %v1226 = vunpack.c.l.b16 %v211
  %v1227 = vunpack.c.l.b16 %v212
  %v1228 = vunpack.c.l.b16 %v213
  %v1229 = vunpack.c.l.b16 %v214
  %v1230 = vunpack.c.l.b16 %v215
  %v1231 = vunpack.c.l.b16 %v216
  %v1232 = vunpack.c.l.b16 %v217
  %v1233 = vunpack.c.l.b16 %v218
  %v1234 = vunpack.c.l.b16 %v219
  %v1235 = vunpack.c.l.b16 %v220
  %v1236 = vunpack.c.l.b16 %v221
  %v1237 = vunpack.c.l.b16 %v222
  %v1238 = vunpack.c.l.b16 %v223
  %v1239 = vunpack.c.l.b16 %v224
  %v1240 = vunpack.c.l.b16 %v225
  %v1241 = vunpack.c.l.b16 %v226
  %v1242 = vunpack.c.l.b16 %v227
  %v1243 = vunpack.c.l.b16 %v228
  %v1244 = vunpack.c.l.b16 %v229
  %v1245 = vunpack.c.l.b16 %v230
  %v1246 = vunpack.c.l.b16 %v231
  %v1247 = vunpack.c.l.b16 %v232
  %v1248 = vunpack.c.l.b16 %v233
  %v1249 = vunpack.c.l.b16 %v234
  %v1250 = vunpack.c.l.b16 %v235
  %v1251 = vunpack.c.l.b16 %v236
  %v1252 = vunpack.c.l.b16 %v237
  %v1253 = vunpack.c.l.b16 %v238
  %v1254 = vunpack.c.l.b16 %v239
  %v1255 = vunpack.c.l.b16 %v240
  %v1256 = vunpack.c.l.b16 %v241
  %v1257 = vunpack.c.l.b16 %v242
  %v1258 = vunpack.c.l.b16 %v243
  %v1259 = vunpack.c.l.b16 %v244
  %v1260 = vunpack.c.l.b16 %v245
  %v1261 = vunpack.c.l.b16 %v246
  %v1262 = vunpack.c.l.b16 %v247
  %v1263 = vunpack.c.l.b16 %v248
  %v1264 = vunpack.c.l.b16 %v249
  %v1265 = vunpack.c.l.b16 %v250
  %v1266 = vunpack.c.l.b16 %v251
  %v1267 = vunpack.c.l.b16 %v252
  %v1268 = vunpack.c.l.b16 %v253
  %v1269 = vunpack.c.l.b16 %v254
  %v1270 = vunpack.c.l.b16 %v255
  %v1271 = vunpack.c.l.b16 %v256
  %v1272 = vunpack.c.l.b16 %v257
  %v1273 = vunpack.c.l.b16 %v258
  %v1274 = vunpack.c.l.b16 %v259
  %v1275 = vunpack.c.l.b16 %v260
  %v1276 = vunpack.c.l.b16 %v261
  %v1277 = vunpack.c.l.b16 %v262
  %v1278 = vunpack.c.l.b16 %v263
  %v1279 = vunpack.c.l.b16 %v264
  %v1280 = vunpack.c.l.b16 %v265
  %v1281 = vunpack.c.l.b16 %v266
  %v1282 = vunpack.c.l.b16 %v267
  %v1283 = vunpack.c.l.b16 %v268
  %v1284 = vunpack.c.l.b16 %v269
  %v1285 = vunpack.c.l.b16 %v270
  %v1286 = vunpack.c.l.b16 %v271
  %v1287 = vunpack.c.l.b16 %v272
  %v1288 = vunpack.c.l.b16 %v273
  %v1289 = vunpack.c.l.b16 %v274
  %v1290 = vunpack.c.l.b16 %v275
  %v1291 = vunpack.c.l.b16 %v276
  %v1292 = vunpack.c.l.b16 %v277
  %v1293 = vunpack.c.l.b16 %v278
  %v1294 = vunpack.c.l.b16 %v279
  %v1295 = vunpack.c.l.b16 %v280
  %v1296 = vunpack.c.l.b16 %v281
  %v1297 = vunpack.c.l.b16 %v282
  %v1298 = vunpack.c.l.b16 %v283
  %v1299 = vunpack.c.l.b16 %v284
  %v1300 = vunpack.c.l.b16 %v285
  %v1301 = vunpack.c.l.b16 %v286
  %v1302 = vunpack.c.l.b16 %v287
  %v1303 = vunpack.c.l.b16 %v288
  %v1304 = vunpack.c.l.b16 %v289
  %v1305 = vunpack.c.l.b16 %v290
  %v1306 = vunpack.c.l.b16 %v291
  %v1307 = vunpack.c.l.b16 %v292
  %v1308 = vunpack.c.l.b16 %v293
  %v1309 = vunpack.c.l.b16 %v294
  %v1310 = vunpack.c.l.b16 %v295
  %v1311 = vunpack.c.l.b16 %v296
  %v1312 = vunpack.c.l.b16 %v297
  %v1313 = vunpack.c.l.b16 %v298
  %v1314 = vunpack.c.l.b16 %v299
  %v1315 = vunpack.c.l.b16 %v300
  %v1316 = vunpack.c.l.b16 %v301
  %v1317 = vunpack.c.l.b16 %v302
  %v1318 = vunpack.c.l.b16 %v303
  %v1319 = vunpack.c.l.b16 %v304
  %v1320 = vunpack.c.l.b16 %v305
  %v1321 = vunpack.c.l.b16 %v306
  %v1322 = vunpack.c.l.b16 %v307
  %v1323 = vunpack.c.l.b16 %v308
  %v1324 = vunpack.c.l.b16 %v309
  %v1325 = vunpack.c.l.b16 %v310
  %v1326 = vunpack.c.l.b16 %v311
  %v1327 = vunpack.c.l.b16 %v312
  %v1328 = vunpack.c.l.b16 %v313
  %v1329 = vunpack.c.l.b16 %v314
  %v1330 = vunpack.c.l.b16 %v315
  %v1331 = vunpack.c.l.b16 %v316
  %v1332 = vunpack.c.l.b16 %v317
  %v1333 = vunpack.c.l.b16 %v318
  %v1334 = vunpack.c.l.b16 %v319
  %v1335 = vunpack.c.l.b16 %v320
  %v1336 = vunpack.c.l.b16 %v321
  %v1337 = vunpack.c.l.b16 %v322
  %v1338 = vunpack.c.l.b16 %v323
  %v1339 = vunpack.c.l.b16 %v324
  %v1340 = vunpack.c.l.b16 %v325
  %v1341 = vunpack.c.l.b16 %v326
  %v1342 = vunpack.c.l.b16 %v327
  %v1343 = vunpack.c.l.b16 %v328
  %v1344 = vunpack.c.l.b16 %v329
  %v1345 = vunpack.c.l.b16 %v330
  %v1346 = vunpack.c.l.b16 %v331
  %v1347 = vunpack.c.l.b16 %v332
  %v1348 = vunpack.c.l.b16 %v333
  %v1349 = vunpack.c.l.b16 %v334
  %v1350 = vunpack.c.l.b16 %v335
  %v1351 = vunpack.c.l.b16 %v336
  %v1352 = vunpack.c.l.b16 %v337
  %v1353 = vunpack.c.l.b16 %v338
  %v1354 = vunpack.c.l.b16 %v339
  %v1355 = vunpack.c.l.b16 %v340
  %v1356 = vunpack.c.l.b16 %v341
  %v1357 = vunpack.c.l.b16 %v342
  %v1358 = vunpack.c.l.b16 %v343
  %v1359 = vunpack.c.l.b16 %v344
  %v1360 = vunpack.c.l.b16 %v345
  %v1361 = vunpack.c.l.b16 %v346
  %v1362 = vunpack.c.l.b16 %v347
  %v1363 = vunpack.c.l.b16 %v348
  %v1364 = vunpack.c.l.b16 %v349
  %v1365 = vunpack.c.l.b16 %v350
  %v1366 = vpack.c.b16 %v1143, %v1142
  %v1367 = vpack.c.b16 %v1145, %v1144
  %v1368 = vpack.c.b16 %v1147, %v1146
  %v1369 = vpack.c.b16 %v1149, %v1148
  %v1370 = vpack.c.b16 %v1151, %v1150
  %v1371 = vpack.c.b16 %v1153, %v1152
  %v1372 = vpack.c.b16 %v1155, %v1154
  %v1373 = vpack.c.b16 %v1157, %v1156
  %v1374 = vpack.c.b16 %v1159, %v1158
  %v1375 = vpack.c.b16 %v1161, %v1160
  %v1376 = vpack.c.b16 %v1163, %v1162
  %v1377 = vpack.c.b16 %v1165, %v1164
  %v1378 = vpack.c.b16 %v1167, %v1166
  %v1379 = vpack.c.b16 %v1169, %v1168
  %v1380 = vpack.c.b16 %v1171, %v1170
  %v1381 = vpack.c.b16 %v1173, %v1172
  %v1382 = vpack.c.b16 %v1175, %v1174
  %v1383 = vpack.c.b16 %v1177, %v1176
  %v1384 = vpack.c.b16 %v1179, %v1178
  %v1385 = vpack.c.b16 %v1181, %v1180
  %v1386 = vpack.c.b16 %v1183, %v1182
  %v1387 = vpack.c.b16 %v1185, %v1184
  %v1388 = vpack.c.b16 %v1187, %v1186
  %v1389 = vpack.c.b16 %v1189, %v1188
  %v1390 = vpack.c.b16 %v1191, %v1190
  %v1391 = vpack.c.b16 %v1193, %v1192
  %v1392 = vpack.c.b16 %v1195, %v1194
  %v1393 = vpack.c.b16 %v1197, %v1196
  %v1394 = vpack.c.b16 %v1199, %v1198
  %v1395 = vpack.c.b16 %v1201, %v1200
  %v1396 = vpack.c.b16 %v1203, %v1202
  %v1397 = vpack.c.b16 %v1205, %v1204
  %v1398 = vpack.c.b16 %v1207, %v1206
  %v1399 = vpack.c.b16 %v1209, %v1208
  %v1400 = vpack.c.b16 %v1211, %v1210
  %v1401 = vpack.c.b16 %v1213, %v1212
  %v1402 = vpack.c.b16 %v1215, %v1214
  %v1403 = vpack.c.b16 %v1217, %v1216
  %v1404 = vpack.c.b16 %v1219, %v1218
  %v1405 = vpack.c.b16 %v1221, %v1220
  %v1406 = vpack.c.b16 %v1223, %v1222
  %v1407 = vpack.c.b16 %v1225, %v1224
  %v1408 = vpack.c.b16 %v1227, %v1226
  %v1409 = vpack.c.b16 %v1229, %v1228
  %v1410 = vpack.c.b16 %v1231, %v1230
  %v1411 = vpack.c.b16 %v1233, %v1232
  %v1412 = vpack.c.b16 %v1235, %v1234
  %v1413 = vpack.c.b16 %v1237, %v1236
  %v1414 = vpack.c.b16 %v1239, %v1238
  %v1415 = vpack.c.b16 %v1241, %v1240
  %v1416 = vpack.c.b16 %v1243, %v1242
  %v1417 = vpack.c.b16 %v1245, %v1244
  %v1418 = vpack.c.b16 %v1247, %v1246
  %v1419 = vpack.c.b16 %v1249, %v1248
  %v1420 = vpack.c.b16 %v1251, %v1250
  %v1421 = vpack.c.b16 %v1253, %v1252
  %v1422 = vpack.c.b16 %v1255, %v1254
  %v1423 = vpack.c.b16 %v1257, %v1256
  %v1424 = vpack.c.b16 %v1259, %v1258
  %v1425 = vpack.c.b16 %v1261, %v1260
  %v1426 = vpack.c.b16 %v1263, %v1262
  %v1427 = vpack.c.b16 %v1265, %v1264
  %v1428 = vpack.c.b16 %v1267, %v1266
  %v1429 = vpack.c.b16 %v1269, %v1268
  %v1430 = vpack.c.b16 %v1271, %v1270
  %v1431 = vpack.c.b16 %v1273, %v1272
  %v1432 = vpack.c.b16 %v1275, %v1274
  %v1433 = vpack.c.b16 %v1277, %v1276
  %v1434 = vpack.c.b16 %v1279, %v1278
  %v1435 = vpack.c.b16 %v1281, %v1280
  %v1436 = vpack.c.b16 %v1283, %v1282
  %v1437 = vpack.c.b16 %v1285, %v1284
  %v1438 = vpack.c.b16 %v1287, %v1286
  %v1439 = vpack.c.b16 %v1289, %v1288
  %v1440 = vpack.c.b16 %v1291, %v1290
  %v1441 = vpack.c.b16 %v1293, %v1292
  %v1442 = vpack.c.b16 %v1295, %v1294
  %v1443 = vpack.c.b16 %v1297, %v1296
  %v1444 = vpack.c.b16 %v1299, %v1298
  %v1445 = vpack.c.b16 %v1301, %v1300
  %v1446 = vpack.c.b16 %v1303, %v1302
  %v1447 = vpack.c.b16 %v1305, %v1304
  %v1448 = vpack.c.b16 %v1307, %v1306
  %v1449 = vpack.c.b16 %v1309, %v1308
  %v1450 = vpack.c.b16 %v1311, %v1310
  %v1451 = vpack.c.b16 %v1313, %v1312
  %v1452 = vpack.c.b16 %v1315, %v1314
  %v1453 = vpack.c.b16 %v1317, %v1316
  %v1454 = vpack.c.b16 %v1319, %v1318
  %v1455 = vpack.c.b16 %v1321, %v1320
  %v1456 = vpack.c.b16 %v1323, %v1322
  %v1457 = vpack.c.b16 %v1325, %v1324
  %v1458 = vpack.c.b16 %v1327, %v1326
  %v1459 = vpack.c.b16 %v1329, %v1328
  %v1460 = vpack.c.b16 %v1331, %v1330
  %v1461 = vpack.c.b16 %v1333, %v1332
  %v1462 = vpack.c.b16 %v1335, %v1334
  %v1463 = vpack.c.b16 %v1337, %v1336
  %v1464 = vpack.c.b16 %v1339, %v1338
  %v1465 = vpack.c.b16 %v1341, %v1340
  %v1466 = vpack.c.b16 %v1343, %v1342
  %v1467 = vpack.c.b16 %v1345, %v1344
  %v1468 = vpack.c.b16 %v1347, %v1346
  %v1469 = vpack.c.b16 %v1349, %v1348
  %v1470 = vpack.c.b16 %v1351, %v1350
  %v1471 = vpack.c.b16 %v1353, %v1352
  %v1472 = vpack.c.b16 %v1355, %v1354
  %v1473 = vpack.c.b16 %v1357, %v1356
  %v1474 = vpack.c.b16 %v1359, %v1358
  %v1475 = vpack.c.b16 %v1361, %v1360
  %v1476 = vpack.c.b16 %v1363, %v1362
  %v1477 = vpack.c.b16 %v1365, %v1364
  %1590 = vmatprep.subr.bf16.mxu0 0
  %1591 = vmatpush1.bf16.msra.mxu0 %v1366
  %1592 = vmatprep.subr.bf16.mxu0 0
  %1593 = vmatpush1.bf16.msra.mxu0 %v1367
  %1594 = vmatprep.subr.bf16.mxu0 0
  %1595 = vmatpush1.bf16.msra.mxu0 %v1368
  %1596 = vmatprep.subr.bf16.mxu0 0
  %1597 = vmatpush1.bf16.msra.mxu0 %v1369
  %1598 = vmatprep.subr.bf16.mxu0 0
  %1599 = vmatpush1.bf16.msra.mxu0 %v1370
  %1600 = vmatprep.subr.bf16.mxu0 0
  %1601 = vmatpush1.bf16.msra.mxu0 %v1371
  %1602 = vmatprep.subr.bf16.mxu0 0
  %1603 = vmatpush1.bf16.msra.mxu0 %v1372
  %1604 = vmatprep.subr.bf16.mxu0 0
  %1605 = vmatpush1.bf16.msra.mxu0 %v1373
  %1606 = vmatprep.subr.bf16.mxu0 0
  %1607 = vmatpush1.bf16.msra.mxu0 %v1374
  %1608 = vmatprep.subr.bf16.mxu0 0
  %1609 = vmatpush1.bf16.msra.mxu0 %v1375
  %1610 = vmatprep.subr.bf16.mxu0 0
  %1611 = vmatpush1.bf16.msra.mxu0 %v1376
  %1612 = vmatprep.subr.bf16.mxu0 0
  %1613 = vmatpush1.bf16.msra.mxu0 %v1377
  %1614 = vmatprep.subr.bf16.mxu0 0
  %1615 = vmatpush1.bf16.msra.mxu0 %v1378
  %1616 = vmatprep.subr.bf16.mxu0 0
  %1617 = vmatpush1.bf16.msra.mxu0 %v1379
  %1618 = vmatprep.subr.bf16.mxu0 0
  %1619 = vmatpush1.bf16.msra.mxu0 %v1380
  %1620 = vmatprep.subr.bf16.mxu0 0
  %1621 = vmatpush1.bf16.msra.mxu0 %v1381
  %1622 = vmatprep.mubr.bf16.mxu0 %v695
  %1623 = vmatmul.mubr.bf16.gmra.mrb[0].mxu0 %v694
  %v1624 = vpop.f32.mrb[0].mxu0
  %v1625 = vadd.f32 %v356, %v1624
  %v1626 = vpop.f32.mrb[0].mxu0
  %v1627 = vpop.f32.mrb[0].mxu0
  %v1628 = vadd.f32 %v356, %v1627
  %v1629 = vpop.f32.mrb[0].mxu0
  %1630 = vmatprep.mubr.bf16.mxu0 %v709
  %1631 = vmatmul.mubr.bf16.gmra.mrb[0].mxu0 %v708
  %v1632 = vpop.f32.mrb[0].mxu0
  %v1633 = vadd.f32 %v356, %v1632
  %v1634 = vpop.f32.mrb[0].mxu0
  %v1635 = vpop.f32.mrb[0].mxu0
  %v1636 = vadd.f32 %v356, %v1635
  %v1637 = vpop.f32.mrb[0].mxu0
  %1638 = vmatprep.mubr.bf16.mxu0 %v723
  %1639 = vmatmul.mubr.bf16.gmra.mrb[0].mxu0 %v722
  %v1640 = vpop.f32.mrb[0].mxu0
  %v1641 = vadd.f32 %v356, %v1640
  %v1642 = vpop.f32.mrb[0].mxu0
  %v1643 = vpop.f32.mrb[0].mxu0
  %v1644 = vadd.f32 %v356, %v1643
  %v1645 = vpop.f32.mrb[0].mxu0
  %1646 = vmatprep.mubr.bf16.mxu0 %v737
  %1647 = vmatmul.mubr.bf16.gmra.mrb[0].mxu0 %v736
  %v1648 = vpop.f32.mrb[0].mxu0
  %v1649 = vadd.f32 %v356, %v1648
  %v1650 = vpop.f32.mrb[0].mxu0
  %v1651 = vpop.f32.mrb[0].mxu0
  %v1652 = vadd.f32 %v356, %v1651
  %v1653 = vpop.f32.mrb[0].mxu0
  %1654 = vmatprep.mubr.bf16.mxu0 %v751
  %1655 = vmatmul.mubr.bf16.gmra.mrb[0].mxu0 %v750
  %v1656 = vpop.f32.mrb[0].mxu0
  %v1657 = vadd.f32 %v356, %v1656
  %v1658 = vpop.f32.mrb[0].mxu0
  %v1659 = vpop.f32.mrb[0].mxu0
  %v1660 = vadd.f32 %v356, %v1659
  %v1661 = vpop.f32.mrb[0].mxu0
  %1662 = vmatprep.mubr.bf16.mxu0 %v765
  %1663 = vmatmul.mubr.bf16.gmra.mrb[0].mxu0 %v764
  %v1664 = vpop.f32.mrb[0].mxu0
  %v1665 = vadd.f32 %v356, %v1664
  %v1666 = vpop.f32.mrb[0].mxu0
  %v1667 = vpop.f32.mrb[0].mxu0
  %v1668 = vadd.f32 %v356, %v1667
  %v1669 = vpop.f32.mrb[0].mxu0
  %1670 = vmatprep.mubr.bf16.mxu0 %v779
  %1671 = vmatmul.mubr.bf16.gmra.mrb[0].mxu0 %v778
  %v1672 = vpop.f32.mrb[0].mxu0
  %v1673 = vadd.f32 %v356, %v1672
  %v1674 = vpop.f32.mrb[0].mxu0
  %v1675 = vpop.f32.mrb[0].mxu0
  %v1676 = vadd.f32 %v356, %v1675
  %v1677 = vpop.f32.mrb[0].mxu0
  %1678 = vmatprep.mubr.bf16.mxu0 %v793
  %1679 = vmatmul.mubr.bf16.gmra.mrb[0].mxu0 %v792
  %v1680 = vpop.f32.mrb[0].mxu0
  %v1681 = vadd.f32 %v356, %v1680
  %v1682 = vpop.f32.mrb[0].mxu0
  %v1683 = vpop.f32.mrb[0].mxu0
  %v1684 = vadd.f32 %v356, %v1683
  %v1685 = vpop.f32.mrb[0].mxu0
  %1686 = vdwg.mxu0
  %1687 = vmatprep.subr.bf16.mxu0 0
  %1688 = vmatpush1.bf16.msra.mxu0 %v1382
  %1689 = vmatprep.subr.bf16.mxu0 0
  %1690 = vmatpush1.bf16.msra.mxu0 %v1383
  %1691 = vmatprep.subr.bf16.mxu0 0
  %1692 = vmatpush1.bf16.msra.mxu0 %v1384
  %1693 = vmatprep.subr.bf16.mxu0 0
  %1694 = vmatpush1.bf16.msra.mxu0 %v1385
  %1695 = vmatprep.subr.bf16.mxu0 0
  %1696 = vmatpush1.bf16.msra.mxu0 %v1386
  %1697 = vmatprep.subr.bf16.mxu0 0
  %1698 = vmatpush1.bf16.msra.mxu0 %v1387
  %1699 = vmatprep.subr.bf16.mxu0 0
  %1700 = vmatpush1.bf16.msra.mxu0 %v1388
  %1701 = vmatprep.subr.bf16.mxu0 0
  %1702 = vmatpush1.bf16.msra.mxu0 %v1389
  %1703 = vmatprep.subr.bf16.mxu0 0
  %1704 = vmatpush1.bf16.msra.mxu0 %v1390
  %1705 = vmatprep.subr.bf16.mxu0 0
  %1706 = vmatpush1.bf16.msra.mxu0 %v1391
  %1707 = vmatprep.subr.bf16.mxu0 0
  %1708 = vmatpush1.bf16.msra.mxu0 %v1392
  %1709 = vmatprep.subr.bf16.mxu0 0
  %1710 = vmatpush1.bf16.msra.mxu0 %v1393
  %1711 = vmatprep.subr.bf16.mxu0 0
  %1712 = vmatpush1.bf16.msra.mxu0 %v1394
  %1713 = vmatprep.subr.bf16.mxu0 0
  %1714 = vmatpush1.bf16.msra.mxu0 %v1395
  %1715 = vmatprep.subr.bf16.mxu0 0
  %1716 = vmatpush1.bf16.msra.mxu0 %v1396
  %1717 = vmatprep.subr.bf16.mxu0 0
  %1718 = vmatpush1.bf16.msra.mxu0 %v1397
  %1719 = vmatprep.mubr.bf16.mxu0 %v697
  %1720 = vmatmul.mubr.bf16.gmra.mrb[0].mxu0 %v696
  %v1721 = vpop.f32.mrb[0].mxu0
  %v1722 = vadd.f32 %v1625, %v1721
  %v1723 = vpop.f32.mrb[0].mxu0
  %v1724 = vpop.f32.mrb[0].mxu0
  %v1725 = vadd.f32 %v1628, %v1724
  %v1726 = vpop.f32.mrb[0].mxu0
  %1727 = vmatprep.mubr.bf16.mxu0 %v711
  %1728 = vmatmul.mubr.bf16.gmra.mrb[0].mxu0 %v710
  %v1729 = vpop.f32.mrb[0].mxu0
  %v1730 = vadd.f32 %v1633, %v1729
  %v1731 = vpop.f32.mrb[0].mxu0
  %v1732 = vpop.f32.mrb[0].mxu0
  %v1733 = vadd.f32 %v1636, %v1732
  %v1734 = vpop.f32.mrb[0].mxu0
  %1735 = vmatprep.mubr.bf16.mxu0 %v725
  %1736 = vmatmul.mubr.bf16.gmra.mrb[0].mxu0 %v724
  %v1737 = vpop.f32.mrb[0].mxu0
  %v1738 = vadd.f32 %v1641, %v1737
  %v1739 = vpop.f32.mrb[0].mxu0
  %v1740 = vpop.f32.mrb[0].mxu0
  %v1741 = vadd.f32 %v1644, %v1740
  %v1742 = vpop.f32.mrb[0].mxu0
  %1743 = vmatprep.mubr.bf16.mxu0 %v739
  %1744 = vmatmul.mubr.bf16.gmra.mrb[0].mxu0 %v738
  %v1745 = vpop.f32.mrb[0].mxu0
  %v1746 = vadd.f32 %v1649, %v1745
  %v1747 = vpop.f32.mrb[0].mxu0
  %v1748 = vpop.f32.mrb[0].mxu0
  %v1749 = vadd.f32 %v1652, %v1748
  %v1750 = vpop.f32.mrb[0].mxu0
  %1751 = vmatprep.mubr.bf16.mxu0 %v753
  %1752 = vmatmul.mubr.bf16.gmra.mrb[0].mxu0 %v752
  %v1753 = vpop.f32.mrb[0].mxu0
  %v1754 = vadd.f32 %v1657, %v1753
  %v1755 = vpop.f32.mrb[0].mxu0
  %v1756 = vpop.f32.mrb[0].mxu0
  %v1757 = vadd.f32 %v1660, %v1756
  %v1758 = vpop.f32.mrb[0].mxu0
  %1759 = vmatprep.mubr.bf16.mxu0 %v767
  %1760 = vmatmul.mubr.bf16.gmra.mrb[0].mxu0 %v766
  %v1761 = vpop.f32.mrb[0].mxu0
  %v1762 = vadd.f32 %v1665, %v1761
  %v1763 = vpop.f32.mrb[0].mxu0
  %v1764 = vpop.f32.mrb[0].mxu0
  %v1765 = vadd.f32 %v1668, %v1764
  %v1766 = vpop.f32.mrb[0].mxu0
  %1767 = vmatprep.mubr.bf16.mxu0 %v781
  %1768 = vmatmul.mubr.bf16.gmra.mrb[0].mxu0 %v780
  %v1769 = vpop.f32.mrb[0].mxu0
  %v1770 = vadd.f32 %v1673, %v1769
  %v1771 = vpop.f32.mrb[0].mxu0
  %v1772 = vpop.f32.mrb[0].mxu0
  %v1773 = vadd.f32 %v1676, %v1772
  %v1774 = vpop.f32.mrb[0].mxu0
  %1775 = vmatprep.mubr.bf16.mxu0 %v795
  %1776 = vmatmul.mubr.bf16.gmra.mrb[0].mxu0 %v794
  %v1777 = vpop.f32.mrb[0].mxu0
  %v1778 = vadd.f32 %v1681, %v1777
  %v1779 = vpop.f32.mrb[0].mxu0
  %v1780 = vpop.f32.mrb[0].mxu0
  %v1781 = vadd.f32 %v1684, %v1780
  %v1782 = vpop.f32.mrb[0].mxu0
  %1783 = vdwg.mxu0
  %1784 = vmatprep.subr.bf16.mxu0 0
  %1785 = vmatpush1.bf16.msra.mxu0 %v1398
  %1786 = vmatprep.subr.bf16.mxu0 0
  %1787 = vmatpush1.bf16.msra.mxu0 %v1399
  %1788 = vmatprep.subr.bf16.mxu0 0
  %1789 = vmatpush1.bf16.msra.mxu0 %v1400
  %1790 = vmatprep.subr.bf16.mxu0 0
  %1791 = vmatpush1.bf16.msra.mxu0 %v1401
  %1792 = vmatprep.subr.bf16.mxu0 0
  %1793 = vmatpush1.bf16.msra.mxu0 %v1402
  %1794 = vmatprep.subr.bf16.mxu0 0
  %1795 = vmatpush1.bf16.msra.mxu0 %v1403
  %1796 = vmatprep.subr.bf16.mxu0 0
  %1797 = vmatpush1.bf16.msra.mxu0 %v1404
  %1798 = vmatprep.subr.bf16.mxu0 0
  %1799 = vmatpush1.bf16.msra.mxu0 %v1405
  %1800 = vmatprep.subr.bf16.mxu0 0
  %1801 = vmatpush1.bf16.msra.mxu0 %v1406
  %1802 = vmatprep.subr.bf16.mxu0 0
  %1803 = vmatpush1.bf16.msra.mxu0 %v1407
  %1804 = vmatprep.subr.bf16.mxu0 0
  %1805 = vmatpush1.bf16.msra.mxu0 %v1408
  %1806 = vmatprep.subr.bf16.mxu0 0
  %1807 = vmatpush1.bf16.msra.mxu0 %v1409
  %1808 = vmatprep.subr.bf16.mxu0 0
  %1809 = vmatpush1.bf16.msra.mxu0 %v1410
  %1810 = vmatprep.subr.bf16.mxu0 0
  %1811 = vmatpush1.bf16.msra.mxu0 %v1411
  %1812 = vmatprep.subr.bf16.mxu0 0
  %1813 = vmatpush1.bf16.msra.mxu0 %v1412
  %1814 = vmatprep.subr.bf16.mxu0 0
  %1815 = vmatpush1.bf16.msra.mxu0 %v1413
  %1816 = vmatprep.mubr.bf16.mxu0 %v699
  %1817 = vmatmul.mubr.bf16.gmra.mrb[0].mxu0 %v698
  %v1818 = vpop.f32.mrb[0].mxu0
  %v1819 = vadd.f32 %v1722, %v1818
  %v1820 = vpop.f32.mrb[0].mxu0
  %v1821 = vpop.f32.mrb[0].mxu0
  %v1822 = vadd.f32 %v1725, %v1821
  %v1823 = vpop.f32.mrb[0].mxu0
  %1824 = vmatprep.mubr.bf16.mxu0 %v713
  %1825 = vmatmul.mubr.bf16.gmra.mrb[0].mxu0 %v712
  %v1826 = vpop.f32.mrb[0].mxu0
  %v1827 = vadd.f32 %v1730, %v1826
  %v1828 = vpop.f32.mrb[0].mxu0
  %v1829 = vpop.f32.mrb[0].mxu0
  %v1830 = vadd.f32 %v1733, %v1829
  %v1831 = vpop.f32.mrb[0].mxu0
  %1832 = vmatprep.mubr.bf16.mxu0 %v727
  %1833 = vmatmul.mubr.bf16.gmra.mrb[0].mxu0 %v726
  %v1834 = vpop.f32.mrb[0].mxu0
  %v1835 = vadd.f32 %v1738, %v1834
  %v1836 = vpop.f32.mrb[0].mxu0
  %v1837 = vpop.f32.mrb[0].mxu0
  %v1838 = vadd.f32 %v1741, %v1837
  %v1839 = vpop.f32.mrb[0].mxu0
  %1840 = vmatprep.mubr.bf16.mxu0 %v741
  %1841 = vmatmul.mubr.bf16.gmra.mrb[0].mxu0 %v740
  %v1842 = vpop.f32.mrb[0].mxu0
  %v1843 = vadd.f32 %v1746, %v1842
  %v1844 = vpop.f32.mrb[0].mxu0
  %v1845 = vpop.f32.mrb[0].mxu0
  %v1846 = vadd.f32 %v1749, %v1845
  %v1847 = vpop.f32.mrb[0].mxu0
  %1848 = vmatprep.mubr.bf16.mxu0 %v755
  %1849 = vmatmul.mubr.bf16.gmra.mrb[0].mxu0 %v754
  %v1850 = vpop.f32.mrb[0].mxu0
  %v1851 = vadd.f32 %v1754, %v1850
  %v1852 = vpop.f32.mrb[0].mxu0
  %v1853 = vpop.f32.mrb[0].mxu0
  %v1854 = vadd.f32 %v1757, %v1853
  %v1855 = vpop.f32.mrb[0].mxu0
  %1856 = vmatprep.mubr.bf16.mxu0 %v769
  %1857 = vmatmul.mubr.bf16.gmra.mrb[0].mxu0 %v768
  %v1858 = vpop.f32.mrb[0].mxu0
  %v1859 = vadd.f32 %v1762, %v1858
  %v1860 = vpop.f32.mrb[0].mxu0
  %v1861 = vpop.f32.mrb[0].mxu0
  %v1862 = vadd.f32 %v1765, %v1861
  %v1863 = vpop.f32.mrb[0].mxu0
  %1864 = vmatprep.mubr.bf16.mxu0 %v783
  %1865 = vmatmul.mubr.bf16.gmra.mrb[0].mxu0 %v782
  %v1866 = vpop.f32.mrb[0].mxu0
  %v1867 = vadd.f32 %v1770, %v1866
  %v1868 = vpop.f32.mrb[0].mxu0
  %v1869 = vpop.f32.mrb[0].mxu0
  %v1870 = vadd.f32 %v1773, %v1869
  %v1871 = vpop.f32.mrb[0].mxu0
  %1872 = vmatprep.mubr.bf16.mxu0 %v797
  %1873 = vmatmul.mubr.bf16.gmra.mrb[0].mxu0 %v796
  %v1874 = vpop.f32.mrb[0].mxu0
  %v1875 = vadd.f32 %v1778, %v1874
  %v1876 = vpop.f32.mrb[0].mxu0
  %v1877 = vpop.f32.mrb[0].mxu0
  %v1878 = vadd.f32 %v1781, %v1877
  %v1879 = vpop.f32.mrb[0].mxu0
  %1880 = vdwg.mxu0
  %1881 = vmatprep.subr.bf16.mxu0 0
  %1882 = vmatpush1.bf16.msra.mxu0 %v1414
  %1883 = vmatprep.subr.bf16.mxu0 0
  %1884 = vmatpush1.bf16.msra.mxu0 %v1415
  %1885 = vmatprep.subr.bf16.mxu0 0
  %1886 = vmatpush1.bf16.msra.mxu0 %v1416
  %1887 = vmatprep.subr.bf16.mxu0 0
  %1888 = vmatpush1.bf16.msra.mxu0 %v1417
  %1889 = vmatprep.subr.bf16.mxu0 0
  %1890 = vmatpush1.bf16.msra.mxu0 %v1418
  %1891 = vmatprep.subr.bf16.mxu0 0
  %1892 = vmatpush1.bf16.msra.mxu0 %v1419
  %1893 = vmatprep.subr.bf16.mxu0 0
  %1894 = vmatpush1.bf16.msra.mxu0 %v1420
  %1895 = vmatprep.subr.bf16.mxu0 0
  %1896 = vmatpush1.bf16.msra.mxu0 %v1421
  %1897 = vmatprep.subr.bf16.mxu0 0
  %1898 = vmatpush1.bf16.msra.mxu0 %v1422
  %1899 = vmatprep.subr.bf16.mxu0 0
  %1900 = vmatpush1.bf16.msra.mxu0 %v1423
  %1901 = vmatprep.subr.bf16.mxu0 0
  %1902 = vmatpush1.bf16.msra.mxu0 %v1424
  %1903 = vmatprep.subr.bf16.mxu0 0
  %1904 = vmatpush1.bf16.msra.mxu0 %v1425
  %1905 = vmatprep.subr.bf16.mxu0 0
  %1906 = vmatpush1.bf16.msra.mxu0 %v1426
  %1907 = vmatprep.subr.bf16.mxu0 0
  %1908 = vmatpush1.bf16.msra.mxu0 %v1427
  %1909 = vmatprep.subr.bf16.mxu0 0
  %1910 = vmatpush1.bf16.msra.mxu0 %v1428
  %1911 = vmatprep.subr.bf16.mxu0 0
  %1912 = vmatpush1.bf16.msra.mxu0 %v1429
  %1913 = vmatprep.mubr.bf16.mxu0 %v701
  %1914 = vmatmul.mubr.bf16.gmra.mrb[0].mxu0 %v700
  %v1915 = vpop.f32.mrb[0].mxu0
  %v1916 = vadd.f32 %v1819, %v1915
  %v1917 = vpop.f32.mrb[0].mxu0
  %v1918 = vpop.f32.mrb[0].mxu0
  %v1919 = vadd.f32 %v1822, %v1918
  %v1920 = vpop.f32.mrb[0].mxu0
  %1921 = vmatprep.mubr.bf16.mxu0 %v715
  %1922 = vmatmul.mubr.bf16.gmra.mrb[0].mxu0 %v714
  %v1923 = vpop.f32.mrb[0].mxu0
  %v1924 = vadd.f32 %v1827, %v1923
  %v1925 = vpop.f32.mrb[0].mxu0
  %v1926 = vpop.f32.mrb[0].mxu0
  %v1927 = vadd.f32 %v1830, %v1926
  %v1928 = vpop.f32.mrb[0].mxu0
  %1929 = vmatprep.mubr.bf16.mxu0 %v729
  %1930 = vmatmul.mubr.bf16.gmra.mrb[0].mxu0 %v728
  %v1931 = vpop.f32.mrb[0].mxu0
  %v1932 = vadd.f32 %v1835, %v1931
  %v1933 = vpop.f32.mrb[0].mxu0
  %v1934 = vpop.f32.mrb[0].mxu0
  %v1935 = vadd.f32 %v1838, %v1934
  %v1936 = vpop.f32.mrb[0].mxu0
  %1937 = vmatprep.mubr.bf16.mxu0 %v743
  %1938 = vmatmul.mubr.bf16.gmra.mrb[0].mxu0 %v742
  %v1939 = vpop.f32.mrb[0].mxu0
  %v1940 = vadd.f32 %v1843, %v1939
  %v1941 = vpop.f32.mrb[0].mxu0
  %v1942 = vpop.f32.mrb[0].mxu0
  %v1943 = vadd.f32 %v1846, %v1942
  %v1944 = vpop.f32.mrb[0].mxu0
  %1945 = vmatprep.mubr.bf16.mxu0 %v757
  %1946 = vmatmul.mubr.bf16.gmra.mrb[0].mxu0 %v756
  %v1947 = vpop.f32.mrb[0].mxu0
  %v1948 = vadd.f32 %v1851, %v1947
  %v1949 = vpop.f32.mrb[0].mxu0
  %v1950 = vpop.f32.mrb[0].mxu0
  %v1951 = vadd.f32 %v1854, %v1950
  %v1952 = vpop.f32.mrb[0].mxu0
  %1953 = vmatprep.mubr.bf16.mxu0 %v771
  %1954 = vmatmul.mubr.bf16.gmra.mrb[0].mxu0 %v770
  %v1955 = vpop.f32.mrb[0].mxu0
  %v1956 = vadd.f32 %v1859, %v1955
  %v1957 = vpop.f32.mrb[0].mxu0
  %v1958 = vpop.f32.mrb[0].mxu0
  %v1959 = vadd.f32 %v1862, %v1958
  %v1960 = vpop.f32.mrb[0].mxu0
  %1961 = vmatprep.mubr.bf16.mxu0 %v785
  %1962 = vmatmul.mubr.bf16.gmra.mrb[0].mxu0 %v784
  %v1963 = vpop.f32.mrb[0].mxu0
  %v1964 = vadd.f32 %v1867, %v1963
  %v1965 = vpop.f32.mrb[0].mxu0
  %v1966 = vpop.f32.mrb[0].mxu0
  %v1967 = vadd.f32 %v1870, %v1966
  %v1968 = vpop.f32.mrb[0].mxu0
  %1969 = vmatprep.mubr.bf16.mxu0 %v799
  %1970 = vmatmul.mubr.bf16.gmra.mrb[0].mxu0 %v798
  %v1971 = vpop.f32.mrb[0].mxu0
  %v1972 = vadd.f32 %v1875, %v1971
  %v1973 = vpop.f32.mrb[0].mxu0
  %v1974 = vpop.f32.mrb[0].mxu0
  %v1975 = vadd.f32 %v1878, %v1974
  %v1976 = vpop.f32.mrb[0].mxu0
  %1977 = vdwg.mxu0
  %1978 = vmatprep.subr.bf16.mxu0 0
  %1979 = vmatpush1.bf16.msra.mxu0 %v1430
  %1980 = vmatprep.subr.bf16.mxu0 0
  %1981 = vmatpush1.bf16.msra.mxu0 %v1431
  %1982 = vmatprep.subr.bf16.mxu0 0
  %1983 = vmatpush1.bf16.msra.mxu0 %v1432
  %1984 = vmatprep.subr.bf16.mxu0 0
  %1985 = vmatpush1.bf16.msra.mxu0 %v1433
  %1986 = vmatprep.subr.bf16.mxu0 0
  %1987 = vmatpush1.bf16.msra.mxu0 %v1434
  %1988 = vmatprep.subr.bf16.mxu0 0
  %1989 = vmatpush1.bf16.msra.mxu0 %v1435
  %1990 = vmatprep.subr.bf16.mxu0 0
  %1991 = vmatpush1.bf16.msra.mxu0 %v1436
  %1992 = vmatprep.subr.bf16.mxu0 0
  %1993 = vmatpush1.bf16.msra.mxu0 %v1437
  %1994 = vmatprep.subr.bf16.mxu0 0
  %1995 = vmatpush1.bf16.msra.mxu0 %v1438
  %1996 = vmatprep.subr.bf16.mxu0 0
  %1997 = vmatpush1.bf16.msra.mxu0 %v1439
  %1998 = vmatprep.subr.bf16.mxu0 0
  %1999 = vmatpush1.bf16.msra.mxu0 %v1440
  %2000 = vmatprep.subr.bf16.mxu0 0
  %2001 = vmatpush1.bf16.msra.mxu0 %v1441
  %2002 = vmatprep.subr.bf16.mxu0 0
  %2003 = vmatpush1.bf16.msra.mxu0 %v1442
  %2004 = vmatprep.subr.bf16.mxu0 0
  %2005 = vmatpush1.bf16.msra.mxu0 %v1443
  %2006 = vmatprep.subr.bf16.mxu0 0
  %2007 = vmatpush1.bf16.msra.mxu0 %v1444
  %2008 = vmatprep.subr.bf16.mxu0 0
  %2009 = vmatpush1.bf16.msra.mxu0 %v1445
  %2010 = vmatprep.mubr.bf16.mxu0 %v703
  %2011 = vmatmul.mubr.bf16.gmra.mrb[0].mxu0 %v702
  %v2012 = vpop.f32.mrb[0].mxu0
  %v2013 = vadd.f32 %v1916, %v2012
  %v2014 = vpop.f32.mrb[0].mxu0
  %v2015 = vpop.f32.mrb[0].mxu0
  %v2016 = vadd.f32 %v1919, %v2015
  %v2017 = vpop.f32.mrb[0].mxu0
  %2018 = vmatprep.mubr.bf16.mxu0 %v717
  %2019 = vmatmul.mubr.bf16.gmra.mrb[0].mxu0 %v716
  %v2020 = vpop.f32.mrb[0].mxu0
  %v2021 = vadd.f32 %v1924, %v2020
  %v2022 = vpop.f32.mrb[0].mxu0
  %v2023 = vpop.f32.mrb[0].mxu0
  %v2024 = vadd.f32 %v1927, %v2023
  %v2025 = vpop.f32.mrb[0].mxu0
  %2026 = vmatprep.mubr.bf16.mxu0 %v731
  %2027 = vmatmul.mubr.bf16.gmra.mrb[0].mxu0 %v730
  %v2028 = vpop.f32.mrb[0].mxu0
  %v2029 = vadd.f32 %v1932, %v2028
  %v2030 = vpop.f32.mrb[0].mxu0
  %v2031 = vpop.f32.mrb[0].mxu0
  %v2032 = vadd.f32 %v1935, %v2031
  %v2033 = vpop.f32.mrb[0].mxu0
  %2034 = vmatprep.mubr.bf16.mxu0 %v745
  %2035 = vmatmul.mubr.bf16.gmra.mrb[0].mxu0 %v744
  %v2036 = vpop.f32.mrb[0].mxu0
  %v2037 = vadd.f32 %v1940, %v2036
  %v2038 = vpop.f32.mrb[0].mxu0
  %v2039 = vpop.f32.mrb[0].mxu0
  %v2040 = vadd.f32 %v1943, %v2039
  %v2041 = vpop.f32.mrb[0].mxu0
  %2042 = vmatprep.mubr.bf16.mxu0 %v759
  %2043 = vmatmul.mubr.bf16.gmra.mrb[0].mxu0 %v758
  %v2044 = vpop.f32.mrb[0].mxu0
  %v2045 = vadd.f32 %v1948, %v2044
  %v2046 = vpop.f32.mrb[0].mxu0
  %v2047 = vpop.f32.mrb[0].mxu0
  %v2048 = vadd.f32 %v1951, %v2047
  %v2049 = vpop.f32.mrb[0].mxu0
  %2050 = vmatprep.mubr.bf16.mxu0 %v773
  %2051 = vmatmul.mubr.bf16.gmra.mrb[0].mxu0 %v772
  %v2052 = vpop.f32.mrb[0].mxu0
  %v2053 = vadd.f32 %v1956, %v2052
  %v2054 = vpop.f32.mrb[0].mxu0
  %v2055 = vpop.f32.mrb[0].mxu0
  %v2056 = vadd.f32 %v1959, %v2055
  %v2057 = vpop.f32.mrb[0].mxu0
  %2058 = vmatprep.mubr.bf16.mxu0 %v787
  %2059 = vmatmul.mubr.bf16.gmra.mrb[0].mxu0 %v786
  %v2060 = vpop.f32.mrb[0].mxu0
  %v2061 = vadd.f32 %v1964, %v2060
  %v2062 = vpop.f32.mrb[0].mxu0
  %v2063 = vpop.f32.mrb[0].mxu0
  %v2064 = vadd.f32 %v1967, %v2063
  %v2065 = vpop.f32.mrb[0].mxu0
  %2066 = vmatprep.mubr.bf16.mxu0 %v801
  %2067 = vmatmul.mubr.bf16.gmra.mrb[0].mxu0 %v800
  %v2068 = vpop.f32.mrb[0].mxu0
  %v2069 = vadd.f32 %v1972, %v2068
  %v2070 = vpop.f32.mrb[0].mxu0
  %v2071 = vpop.f32.mrb[0].mxu0
  %v2072 = vadd.f32 %v1975, %v2071
  %v2073 = vpop.f32.mrb[0].mxu0
  %2074 = vdwg.mxu0
  %2075 = vmatprep.subr.bf16.mxu0 0
  %2076 = vmatpush1.bf16.msra.mxu0 %v1446
  %2077 = vmatprep.subr.bf16.mxu0 0
  %2078 = vmatpush1.bf16.msra.mxu0 %v1447
  %2079 = vmatprep.subr.bf16.mxu0 0
  %2080 = vmatpush1.bf16.msra.mxu0 %v1448
  %2081 = vmatprep.subr.bf16.mxu0 0
  %2082 = vmatpush1.bf16.msra.mxu0 %v1449
  %2083 = vmatprep.subr.bf16.mxu0 0
  %2084 = vmatpush1.bf16.msra.mxu0 %v1450
  %2085 = vmatprep.subr.bf16.mxu0 0
  %2086 = vmatpush1.bf16.msra.mxu0 %v1451
  %2087 = vmatprep.subr.bf16.mxu0 0
  %2088 = vmatpush1.bf16.msra.mxu0 %v1452
  %2089 = vmatprep.subr.bf16.mxu0 0
  %2090 = vmatpush1.bf16.msra.mxu0 %v1453
  %2091 = vmatprep.subr.bf16.mxu0 0
  %2092 = vmatpush1.bf16.msra.mxu0 %v1454
  %2093 = vmatprep.subr.bf16.mxu0 0
  %2094 = vmatpush1.bf16.msra.mxu0 %v1455
  %2095 = vmatprep.subr.bf16.mxu0 0
  %2096 = vmatpush1.bf16.msra.mxu0 %v1456
  %2097 = vmatprep.subr.bf16.mxu0 0
  %2098 = vmatpush1.bf16.msra.mxu0 %v1457
  %2099 = vmatprep.subr.bf16.mxu0 0
  %2100 = vmatpush1.bf16.msra.mxu0 %v1458
  %2101 = vmatprep.subr.bf16.mxu0 0
  %2102 = vmatpush1.bf16.msra.mxu0 %v1459
  %2103 = vmatprep.subr.bf16.mxu0 0
  %2104 = vmatpush1.bf16.msra.mxu0 %v1460
  %2105 = vmatprep.subr.bf16.mxu0 0
  %2106 = vmatpush1.bf16.msra.mxu0 %v1461
  %2107 = vmatprep.mubr.bf16.mxu0 %v705
  %2108 = vmatmul.mubr.bf16.gmra.mrb[0].mxu0 %v704
  %v2109 = vpop.f32.mrb[0].mxu0
  %v2110 = vadd.f32 %v2013, %v2109
  %v2111 = vpop.f32.mrb[0].mxu0
  %v2112 = vpop.f32.mrb[0].mxu0
  %v2113 = vadd.f32 %v2016, %v2112
  %v2114 = vpop.f32.mrb[0].mxu0
  %2115 = vmatprep.mubr.bf16.mxu0 %v719
  %2116 = vmatmul.mubr.bf16.gmra.mrb[0].mxu0 %v718
  %v2117 = vpop.f32.mrb[0].mxu0
  %v2118 = vadd.f32 %v2021, %v2117
  %v2119 = vpop.f32.mrb[0].mxu0
  %v2120 = vpop.f32.mrb[0].mxu0
  %v2121 = vadd.f32 %v2024, %v2120
  %v2122 = vpop.f32.mrb[0].mxu0
  %2123 = vmatprep.mubr.bf16.mxu0 %v733
  %2124 = vmatmul.mubr.bf16.gmra.mrb[0].mxu0 %v732
  %v2125 = vpop.f32.mrb[0].mxu0
  %v2126 = vadd.f32 %v2029, %v2125
  %v2127 = vpop.f32.mrb[0].mxu0
  %v2128 = vpop.f32.mrb[0].mxu0
  %v2129 = vadd.f32 %v2032, %v2128
  %v2130 = vpop.f32.mrb[0].mxu0
  %2131 = vmatprep.mubr.bf16.mxu0 %v747
  %2132 = vmatmul.mubr.bf16.gmra.mrb[0].mxu0 %v746
  %v2133 = vpop.f32.mrb[0].mxu0
  %v2134 = vadd.f32 %v2037, %v2133
  %v2135 = vpop.f32.mrb[0].mxu0
  %v2136 = vpop.f32.mrb[0].mxu0
  %v2137 = vadd.f32 %v2040, %v2136
  %v2138 = vpop.f32.mrb[0].mxu0
  %2139 = vmatprep.mubr.bf16.mxu0 %v761
  %2140 = vmatmul.mubr.bf16.gmra.mrb[0].mxu0 %v760
  %v2141 = vpop.f32.mrb[0].mxu0
  %v2142 = vadd.f32 %v2045, %v2141
  %v2143 = vpop.f32.mrb[0].mxu0
  %v2144 = vpop.f32.mrb[0].mxu0
  %v2145 = vadd.f32 %v2048, %v2144
  %v2146 = vpop.f32.mrb[0].mxu0
  %2147 = vmatprep.mubr.bf16.mxu0 %v775
  %2148 = vmatmul.mubr.bf16.gmra.mrb[0].mxu0 %v774
  %v2149 = vpop.f32.mrb[0].mxu0
  %v2150 = vadd.f32 %v2053, %v2149
  %v2151 = vpop.f32.mrb[0].mxu0
  %v2152 = vpop.f32.mrb[0].mxu0
  %v2153 = vadd.f32 %v2056, %v2152
  %v2154 = vpop.f32.mrb[0].mxu0
  %2155 = vmatprep.mubr.bf16.mxu0 %v789
  %2156 = vmatmul.mubr.bf16.gmra.mrb[0].mxu0 %v788
  %v2157 = vpop.f32.mrb[0].mxu0
  %v2158 = vadd.f32 %v2061, %v2157
  %v2159 = vpop.f32.mrb[0].mxu0
  %v2160 = vpop.f32.mrb[0].mxu0
  %v2161 = vadd.f32 %v2064, %v2160
  %v2162 = vpop.f32.mrb[0].mxu0
  %2163 = vmatprep.mubr.bf16.mxu0 %v803
  %2164 = vmatmul.mubr.bf16.gmra.mrb[0].mxu0 %v802
  %v2165 = vpop.f32.mrb[0].mxu0
  %v2166 = vadd.f32 %v2069, %v2165
  %v2167 = vpop.f32.mrb[0].mxu0
  %v2168 = vpop.f32.mrb[0].mxu0
  %v2169 = vadd.f32 %v2072, %v2168
  %v2170 = vpop.f32.mrb[0].mxu0
  %2171 = vdwg.mxu0
  %2172 = vmatprep.subr.bf16.mxu0 0
  %2173 = vmatpush1.bf16.msra.mxu0 %v1462
  %2174 = vmatprep.subr.bf16.mxu0 0
  %2175 = vmatpush1.bf16.msra.mxu0 %v1463
  %2176 = vmatprep.subr.bf16.mxu0 0
  %2177 = vmatpush1.bf16.msra.mxu0 %v1464
  %2178 = vmatprep.subr.bf16.mxu0 0
  %2179 = vmatpush1.bf16.msra.mxu0 %v1465
  %2180 = vmatprep.subr.bf16.mxu0 0
  %2181 = vmatpush1.bf16.msra.mxu0 %v1466
  %2182 = vmatprep.subr.bf16.mxu0 0
  %2183 = vmatpush1.bf16.msra.mxu0 %v1467
  %2184 = vmatprep.subr.bf16.mxu0 0
  %2185 = vmatpush1.bf16.msra.mxu0 %v1468
  %2186 = vmatprep.subr.bf16.mxu0 0
  %2187 = vmatpush1.bf16.msra.mxu0 %v1469
  %2188 = vmatprep.subr.bf16.mxu0 0
  %2189 = vmatpush1.bf16.msra.mxu0 %v1470
  %2190 = vmatprep.subr.bf16.mxu0 0
  %2191 = vmatpush1.bf16.msra.mxu0 %v1471
  %2192 = vmatprep.subr.bf16.mxu0 0
  %2193 = vmatpush1.bf16.msra.mxu0 %v1472
  %2194 = vmatprep.subr.bf16.mxu0 0
  %2195 = vmatpush1.bf16.msra.mxu0 %v1473
  %2196 = vmatprep.subr.bf16.mxu0 0
  %2197 = vmatpush1.bf16.msra.mxu0 %v1474
  %2198 = vmatprep.subr.bf16.mxu0 0
  %2199 = vmatpush1.bf16.msra.mxu0 %v1475
  %2200 = vmatprep.subr.bf16.mxu0 0
  %2201 = vmatpush1.bf16.msra.mxu0 %v1476
  %2202 = vmatprep.subr.bf16.mxu0 0
  %2203 = vmatpush1.bf16.msra.mxu0 %v1477
  %2204 = vmatprep.mubr.bf16.mxu0 %v707
  %2205 = vmatmul.mubr.bf16.gmra.mrb[0].mxu0 %v706
  %v2206 = vpop.f32.mrb[0].mxu0
  %v2207 = vadd.f32 %v2110, %v2206
  %v2208 = vpop.f32.mrb[0].mxu0
  %v2209 = vpop.f32.mrb[0].mxu0
  %v2210 = vadd.f32 %v2113, %v2209
  %v2211 = vpop.f32.mrb[0].mxu0
  %2212 = vmatprep.mubr.bf16.mxu0 %v721
  %2213 = vmatmul.mubr.bf16.gmra.mrb[0].mxu0 %v720
  %v2214 = vpop.f32.mrb[0].mxu0
  %v2215 = vadd.f32 %v2118, %v2214
  %v2216 = vpop.f32.mrb[0].mxu0
  %v2217 = vpop.f32.mrb[0].mxu0
  %v2218 = vadd.f32 %v2121, %v2217
  %v2219 = vpop.f32.mrb[0].mxu0
  %2220 = vmatprep.mubr.bf16.mxu0 %v735
  %2221 = vmatmul.mubr.bf16.gmra.mrb[0].mxu0 %v734
  %v2222 = vpop.f32.mrb[0].mxu0
  %v2223 = vadd.f32 %v2126, %v2222
  %v2224 = vpop.f32.mrb[0].mxu0
  %v2225 = vpop.f32.mrb[0].mxu0
  %v2226 = vadd.f32 %v2129, %v2225
  %v2227 = vpop.f32.mrb[0].mxu0
  %2228 = vmatprep.mubr.bf16.mxu0 %v749
  %2229 = vmatmul.mubr.bf16.gmra.mrb[0].mxu0 %v748
  %v2230 = vpop.f32.mrb[0].mxu0
  %v2231 = vadd.f32 %v2134, %v2230
  %v2232 = vpop.f32.mrb[0].mxu0
  %v2233 = vpop.f32.mrb[0].mxu0
  %v2234 = vadd.f32 %v2137, %v2233
  %v2235 = vpop.f32.mrb[0].mxu0
  %2236 = vmatprep.mubr.bf16.mxu0 %v763
  %2237 = vmatmul.mubr.bf16.gmra.mrb[0].mxu0 %v762
  %v2238 = vpop.f32.mrb[0].mxu0
  %v2239 = vadd.f32 %v2142, %v2238
  %v2240 = vpop.f32.mrb[0].mxu0
  %v2241 = vpop.f32.mrb[0].mxu0
  %v2242 = vadd.f32 %v2145, %v2241
  %v2243 = vpop.f32.mrb[0].mxu0
  %2244 = vmatprep.mubr.bf16.mxu0 %v777
  %2245 = vmatmul.mubr.bf16.gmra.mrb[0].mxu0 %v776
  %v2246 = vpop.f32.mrb[0].mxu0
  %v2247 = vadd.f32 %v2150, %v2246
  %v2248 = vpop.f32.mrb[0].mxu0
  %v2249 = vpop.f32.mrb[0].mxu0
  %v2250 = vadd.f32 %v2153, %v2249
  %v2251 = vpop.f32.mrb[0].mxu0
  %2252 = vmatprep.mubr.bf16.mxu0 %v791
  %2253 = vmatmul.mubr.bf16.gmra.mrb[0].mxu0 %v790
  %v2254 = vpop.f32.mrb[0].mxu0
  %v2255 = vadd.f32 %v2158, %v2254
  %v2256 = vpop.f32.mrb[0].mxu0
  %v2257 = vpop.f32.mrb[0].mxu0
  %v2258 = vadd.f32 %v2161, %v2257
  %v2259 = vpop.f32.mrb[0].mxu0
  %2260 = vmatprep.mubr.bf16.mxu0 %v805
  %2261 = vmatmul.mubr.bf16.gmra.mrb[0].mxu0 %v804
  %v2262 = vpop.f32.mrb[0].mxu0
  %v2263 = vadd.f32 %v2166, %v2262
  %v2264 = vpop.f32.mrb[0].mxu0
  %v2265 = vpop.f32.mrb[0].mxu0
  %v2266 = vadd.f32 %v2169, %v2265
  %v2267 = vpop.f32.mrb[0].mxu0
  %2268 = vdwg.mxu0
  %v2269 = vmax.f32 %v2207, 0.0
  %v2270 = vmax.f32 %v2210, 0.0
  %v2271 = vmax.f32 %v2215, 0.0
  %v2272 = vmax.f32 %v2218, 0.0
  %v2273 = vmax.f32 %v2223, 0.0
  %v2274 = vmax.f32 %v2226, 0.0
  %v2275 = vmax.f32 %v2231, 0.0
  %v2276 = vmax.f32 %v2234, 0.0
  %v2277 = vmax.f32 %v2239, 0.0
  %v2278 = vmax.f32 %v2242, 0.0
  %v2279 = vmax.f32 %v2247, 0.0
  %v2280 = vmax.f32 %v2250, 0.0
  %v2281 = vmax.f32 %v2255, 0.0
  %v2282 = vmax.f32 %v2258, 0.0
  %v2283 = vmax.f32 %v2263, 0.0
  %v2284 = vmax.f32 %v2266, 0.0
  %v2285 = vpack.c.bf16 %v2270, %v2269
  %v2286 = vpack.c.bf16 %v2272, %v2271
  %v2287 = vpack.c.bf16 %v2274, %v2273
  %v2288 = vpack.c.bf16 %v2276, %v2275
  %v2289 = vpack.c.bf16 %v2278, %v2277
  %v2290 = vpack.c.bf16 %v2280, %v2279
  %v2291 = vpack.c.bf16 %v2282, %v2281
  %v2292 = vpack.c.bf16 %v2284, %v2283
  %v2301 = vunpack.c.l.b16 %v2285
  %v2302 = vunpack.c.h.b16 %v2285
  %v2303 = vunpack.c.l.b16 %v2286
  %v2304 = vunpack.c.h.b16 %v2286
  %v2305 = vunpack.c.l.b16 %v2287
  %v2306 = vunpack.c.h.b16 %v2287
  %v2307 = vunpack.c.l.b16 %v2288
  %v2308 = vunpack.c.h.b16 %v2288
  %v2309 = vunpack.c.l.b16 %v2289
  %v2310 = vunpack.c.h.b16 %v2289
  %v2311 = vunpack.c.l.b16 %v2290
  %v2312 = vunpack.c.h.b16 %v2290
  %v2313 = vunpack.c.l.b16 %v2291
  %v2314 = vunpack.c.h.b16 %v2291
  %v2315 = vunpack.c.l.b16 %v2292
  %v2316 = vunpack.c.h.b16 %v2292
  %v2317 = vpack.c.b16 %v2301, %v2301
  %v2318 = vpack.c.b16 %v2302, %v2302
  %v2319 = vpack.c.b16 %v2303, %v2303
  %v2320 = vpack.c.b16 %v2304, %v2304
  %v2321 = vpack.c.b16 %v2305, %v2305
  %v2322 = vpack.c.b16 %v2306, %v2306
  %v2323 = vpack.c.b16 %v2307, %v2307
  %v2324 = vpack.c.b16 %v2308, %v2308
  %v2325 = vpack.c.b16 %v2309, %v2309
  %v2326 = vpack.c.b16 %v2310, %v2310
  %v2327 = vpack.c.b16 %v2311, %v2311
  %v2328 = vpack.c.b16 %v2312, %v2312
  %v2329 = vpack.c.b16 %v2313, %v2313
  %v2330 = vpack.c.b16 %v2314, %v2314
  %v2331 = vpack.c.b16 %v2315, %v2315
  %v2332 = vpack.c.b16 %v2316, %v2316
  %2349 = vst [vmem:[%s3] sm:$0xf] %v2317
  %2350 = vst [vmem:[%s3 + $0x4] sm:$0xf] %v2318
  %2351 = vst [vmem:[%s3 + $0x8] sm:$0xf] %v2319
  %2352 = vst [vmem:[%s3 + $0xc] sm:$0xf] %v2320
  %2353 = vst [vmem:[%s3 + $0x10] sm:$0xf] %v2321
  %2354 = vst [vmem:[%s3 + $0x14] sm:$0xf] %v2322
  %2355 = vst [vmem:[%s3 + $0x18] sm:$0xf] %v2323
  %2356 = vst [vmem:[%s3 + $0x1c] sm:$0xf] %v2324
  %2357 = vst [vmem:[%s3 + $0x20] sm:$0xf] %v2325
  %2358 = vst [vmem:[%s3 + $0x24] sm:$0xf] %v2326
  %2359 = vst [vmem:[%s3 + $0x28] sm:$0xf] %v2327
  %2360 = vst [vmem:[%s3 + $0x2c] sm:$0xf] %v2328
  %2361 = vst [vmem:[%s3 + $0x30] sm:$0xf] %v2329
  %2362 = vst [vmem:[%s3 + $0x34] sm:$0xf] %v2330
  %2363 = vst [vmem:[%s3 + $0x38] sm:$0xf] %v2331
  %2364 = vst [vmem:[%s3 + $0x3c] sm:$0xf] %v2332
  // Predicated region
  $region14: #{net_forward.10} parent=0 // pred_check
    _
  $region15: #{net_forward.10} parent=0 // pred_check_branch
    %2366 = sbr.rel (0) target = $region17
  $region16: #{net_forward.10} parent=0 // pred_region
    _
  $region17: #{net_forward.10} parent=0 // pred_fallthru
    _
  // Predicated region
  $region18: #{net_forward.10} parent=0 // pred_check
    _
  $region19: #{net_forward.10} parent=0 // pred_check_branch
    %2368 = sbr.rel (0) target = $region21
  $region20: #{net_forward.10} parent=0 // pred_region
    _
  $region21: #{net_forward.10} parent=0 // pred_fallthru
    _

// kernel: net_forward.11
$region0: #{net_forward.11}
  #allocation0 [shape = 'u32[]', space=smem, size = 0x4, offset = 0x4, fixed_abs, tag = 'smem constant byte address 0x4 - core index']
  #allocation1 [shape = 'u32[144,128]{1,0:T(1,128)}', space=vmem, size = 0x12000, scoped, tag = 'internal scratch']
  %s0 = inlined_call_operand.vmem [shape: bf16[1024,896], index: 0, kind: input, shape index: {}]
  %s1 = inlined_call_operand.vmem [shape: bf16[896,128], index: 1, kind: input, shape index: {}]
  %s2 = inlined_call_operand.vmem [shape: f32[1,128], index: 2, kind: input, shape index: {}]
  %s3 = inlined_call_operand.vmem [shape: bf16[1024,128], index: 3, kind: output, shape index: {}]
  %s4 = sld [smem:[#allocation0]]
  $region22: #{net_forward.11} parent=0
    _
  %s6 = ssub.s32 1, %s4
  %s7 = scalar_select 0, %s6, %s4
  // Predicated region
  $region2: #{net_forward.11} parent=0 // pred_check
    _
  $region3: #{net_forward.11} parent=0 // pred_check_branch
    %9 = sbr.rel (0) target = $region5
  $region4: #{net_forward.11} parent=0 // pred_region
    _
  $region5: #{net_forward.11} parent=0 // pred_fallthru
    _
  // Predicated region
  $region6: #{net_forward.11} parent=0 // pred_check
    _
  $region7: #{net_forward.11} parent=0 // pred_check_branch
    %11 = sbr.rel (0) target = $region9
  $region8: #{net_forward.11} parent=0 // pred_region
    _
  $region9: #{net_forward.11} parent=0 // pred_fallthru
    _
  // Predicated region
  $region10: #{net_forward.11} parent=0 // pred_check
    _
  $region11: #{net_forward.11} parent=0 // pred_check_branch
    %13 = sbr.rel (0) target = $region13
  $region12: #{net_forward.11} parent=0 // pred_region
    _
  $region13: #{net_forward.11} parent=0 // pred_fallthru
    _
  %v15 = vld [vmem:[%s0] sm:$0xff]
  %v16 = vld [vmem:[%s0 + $0x8] sm:$0xff]
  %v17 = vld [vmem:[%s0 + $0x10] sm:$0xff]
  %v18 = vld [vmem:[%s0 + $0x18] sm:$0xf]
  %v19 = vld [vmem:[%s0 + $0x1c] sm:$0xff]
  %v20 = vld [vmem:[%s0 + $0x24] sm:$0xff]
  %v21 = vld [vmem:[%s0 + $0x2c] sm:$0xff]
  %v22 = vld [vmem:[%s0 + $0x34] sm:$0xf]
  %v23 = vld [vmem:[%s0 + $0x38] sm:$0xff]
  %v24 = vld [vmem:[%s0 + $0x40] sm:$0xff]
  %v25 = vld [vmem:[%s0 + $0x48] sm:$0xff]
  %v26 = vld [vmem:[%s0 + $0x50] sm:$0xf]
  %v27 = vld [vmem:[%s0 + $0x54] sm:$0xff]
  %v28 = vld [vmem:[%s0 + $0x5c] sm:$0xff]
  %v29 = vld [vmem:[%s0 + $0x64] sm:$0xff]
  %v30 = vld [vmem:[%s0 + $0x6c] sm:$0xf]
  %v31 = vld [vmem:[%s0 + $0x70] sm:$0xff]
  %v32 = vld [vmem:[%s0 + $0x78] sm:$0xff]
  %v33 = vld [vmem:[%s0 + $0x80] sm:$0xff]
  %v34 = vld [vmem:[%s0 + $0x88] sm:$0xf]
  %v35 = vld [vmem:[%s0 + $0x8c] sm:$0xff]
  %v36 = vld [vmem:[%s0 + $0x94] sm:$0xff]
  %v37 = vld [vmem:[%s0 + $0x9c] sm:$0xff]
  %v38 = vld [vmem:[%s0 + $0xa4] sm:$0xf]
  %v39 = vld [vmem:[%s0 + $0xa8] sm:$0xff]
  %v40 = vld [vmem:[%s0 + $0xb0] sm:$0xff]
  %v41 = vld [vmem:[%s0 + $0xb8] sm:$0xff]
  %v42 = vld [vmem:[%s0 + $0xc0] sm:$0xf]
  %v43 = vld [vmem:[%s0 + $0xc4] sm:$0xff]
  %v44 = vld [vmem:[%s0 + $0xcc] sm:$0xff]
  %v45 = vld [vmem:[%s0 + $0xd4] sm:$0xff]
  %v46 = vld [vmem:[%s0 + $0xdc] sm:$0xf]
  %v47 = vld [vmem:[%s0 + $0xe0] sm:$0xff]
  %v48 = vld [vmem:[%s0 + $0xe8] sm:$0xff]
  %v49 = vld [vmem:[%s0 + $0xf0] sm:$0xff]
  %v50 = vld [vmem:[%s0 + $0xf8] sm:$0xf]
  %v51 = vld [vmem:[%s0 + $0xfc] sm:$0xff]
  %v52 = vld [vmem:[%s0 + $0x104] sm:$0xff]
  %v53 = vld [vmem:[%s0 + $0x10c] sm:$0xff]
  %v54 = vld [vmem:[%s0 + $0x114] sm:$0xf]
  %v55 = vld [vmem:[%s0 + $0x118] sm:$0xff]
  %v56 = vld [vmem:[%s0 + $0x120] sm:$0xff]
  %v57 = vld [vmem:[%s0 + $0x128] sm:$0xff]
  %v58 = vld [vmem:[%s0 + $0x130] sm:$0xf]
  %v59 = vld [vmem:[%s0 + $0x134] sm:$0xff]
  %v60 = vld [vmem:[%s0 + $0x13c] sm:$0xff]
  %v61 = vld [vmem:[%s0 + $0x144] sm:$0xff]
  %v62 = vld [vmem:[%s0 + $0x14c] sm:$0xf]
  %v63 = vld [vmem:[%s0 + $0x150] sm:$0xff]
  %v64 = vld [vmem:[%s0 + $0x158] sm:$0xff]
  %v65 = vld [vmem:[%s0 + $0x160] sm:$0xff]
  %v66 = vld [vmem:[%s0 + $0x168] sm:$0xf]
  %v67 = vld [vmem:[%s0 + $0x16c] sm:$0xff]
  %v68 = vld [vmem:[%s0 + $0x174] sm:$0xff]
  %v69 = vld [vmem:[%s0 + $0x17c] sm:$0xff]
  %v70 = vld [vmem:[%s0 + $0x184] sm:$0xf]
  %v71 = vld [vmem:[%s0 + $0x188] sm:$0xff]
  %v72 = vld [vmem:[%s0 + $0x190] sm:$0xff]
  %v73 = vld [vmem:[%s0 + $0x198] sm:$0xff]
  %v74 = vld [vmem:[%s0 + $0x1a0] sm:$0xf]
  %v75 = vld [vmem:[%s0 + $0x1a4] sm:$0xff]
  %v76 = vld [vmem:[%s0 + $0x1ac] sm:$0xff]
  %v77 = vld [vmem:[%s0 + $0x1b4] sm:$0xff]
  %v78 = vld [vmem:[%s0 + $0x1bc] sm:$0xf]
  %v79 = vld [vmem:[%s0 + $0x1c0] sm:$0xff]
  %v80 = vld [vmem:[%s0 + $0x1c8] sm:$0xff]
  %v81 = vld [vmem:[%s0 + $0x1d0] sm:$0xff]
  %v82 = vld [vmem:[%s0 + $0x1d8] sm:$0xf]
  %v83 = vld [vmem:[%s0 + $0x1dc] sm:$0xff]
  %v84 = vld [vmem:[%s0 + $0x1e4] sm:$0xff]
  %v85 = vld [vmem:[%s0 + $0x1ec] sm:$0xff]
  %v86 = vld [vmem:[%s0 + $0x1f4] sm:$0xf]
  %v87 = vld [vmem:[%s0 + $0x1f8] sm:$0xff]
  %v88 = vld [vmem:[%s0 + $0x200] sm:$0xff]
  %v89 = vld [vmem:[%s0 + $0x208] sm:$0xff]
  %v90 = vld [vmem:[%s0 + $0x210] sm:$0xf]
  %v91 = vld [vmem:[%s0 + $0x214] sm:$0xff]
  %v92 = vld [vmem:[%s0 + $0x21c] sm:$0xff]
  %v93 = vld [vmem:[%s0 + $0x224] sm:$0xff]
  %v94 = vld [vmem:[%s0 + $0x22c] sm:$0xf]
  %v95 = vld [vmem:[%s0 + $0x230] sm:$0xff]
  %v96 = vld [vmem:[%s0 + $0x238] sm:$0xff]
  %v97 = vld [vmem:[%s0 + $0x240] sm:$0xff]
  %v98 = vld [vmem:[%s0 + $0x248] sm:$0xf]
  %v99 = vld [vmem:[%s0 + $0x24c] sm:$0xff]
  %v100 = vld [vmem:[%s0 + $0x254] sm:$0xff]
  %v101 = vld [vmem:[%s0 + $0x25c] sm:$0xff]
  %v102 = vld [vmem:[%s0 + $0x264] sm:$0xf]
  %v103 = vld [vmem:[%s0 + $0x268] sm:$0xff]
  %v104 = vld [vmem:[%s0 + $0x270] sm:$0xff]
  %v105 = vld [vmem:[%s0 + $0x278] sm:$0xff]
  %v106 = vld [vmem:[%s0 + $0x280] sm:$0xf]
  %v107 = vld [vmem:[%s0 + $0x284] sm:$0xff]
  %v108 = vld [vmem:[%s0 + $0x28c] sm:$0xff]
  %v109 = vld [vmem:[%s0 + $0x294] sm:$0xff]
  %v110 = vld [vmem:[%s0 + $0x29c] sm:$0xf]
  %v111 = vld [vmem:[%s0 + $0x2a0] sm:$0xff]
  %v112 = vld [vmem:[%s0 + $0x2a8] sm:$0xff]
  %v113 = vld [vmem:[%s0 + $0x2b0] sm:$0xff]
  %v114 = vld [vmem:[%s0 + $0x2b8] sm:$0xf]
  %v115 = vld [vmem:[%s0 + $0x2bc] sm:$0xff]
  %v116 = vld [vmem:[%s0 + $0x2c4] sm:$0xff]
  %v117 = vld [vmem:[%s0 + $0x2cc] sm:$0xff]
  %v118 = vld [vmem:[%s0 + $0x2d4] sm:$0xf]
  %v119 = vld [vmem:[%s0 + $0x2d8] sm:$0xff]
  %v120 = vld [vmem:[%s0 + $0x2e0] sm:$0xff]
  %v121 = vld [vmem:[%s0 + $0x2e8] sm:$0xff]
  %v122 = vld [vmem:[%s0 + $0x2f0] sm:$0xf]
  %v123 = vld [vmem:[%s0 + $0x2f4] sm:$0xff]
  %v124 = vld [vmem:[%s0 + $0x2fc] sm:$0xff]
  %v125 = vld [vmem:[%s0 + $0x304] sm:$0xff]
  %v126 = vld [vmem:[%s0 + $0x30c] sm:$0xf]
  %v127 = vld [vmem:[%s0 + $0x310] sm:$0xff]
  %v128 = vld [vmem:[%s0 + $0x318] sm:$0xff]
  %v129 = vld [vmem:[%s0 + $0x320] sm:$0xff]
  %v130 = vld [vmem:[%s0 + $0x328] sm:$0xf]
  %v131 = vld [vmem:[%s0 + $0x32c] sm:$0xff]
  %v132 = vld [vmem:[%s0 + $0x334] sm:$0xff]
  %v133 = vld [vmem:[%s0 + $0x33c] sm:$0xff]
  %v134 = vld [vmem:[%s0 + $0x344] sm:$0xf]
  %v135 = vld [vmem:[%s0 + $0x348] sm:$0xff]
  %v136 = vld [vmem:[%s0 + $0x350] sm:$0xff]
  %v137 = vld [vmem:[%s0 + $0x358] sm:$0xff]
  %v138 = vld [vmem:[%s0 + $0x360] sm:$0xf]
  %v139 = vld [vmem:[%s0 + $0x364] sm:$0xff]
  %v140 = vld [vmem:[%s0 + $0x36c] sm:$0xff]
  %v141 = vld [vmem:[%s0 + $0x374] sm:$0xff]
  %v142 = vld [vmem:[%s0 + $0x37c] sm:$0xf]
  %v143 = vld [vmem:[%s0 + $0x380] sm:$0xff]
  %v144 = vld [vmem:[%s0 + $0x388] sm:$0xff]
  %v145 = vld [vmem:[%s0 + $0x390] sm:$0xff]
  %v146 = vld [vmem:[%s0 + $0x398] sm:$0xf]
  %v147 = vld [vmem:[%s0 + $0x39c] sm:$0xff]
  %v148 = vld [vmem:[%s0 + $0x3a4] sm:$0xff]
  %v149 = vld [vmem:[%s0 + $0x3ac] sm:$0xff]
  %v150 = vld [vmem:[%s0 + $0x3b4] sm:$0xf]
  %v151 = vld [vmem:[%s0 + $0x3b8] sm:$0xff]
  %v152 = vld [vmem:[%s0 + $0x3c0] sm:$0xff]
  %v153 = vld [vmem:[%s0 + $0x3c8] sm:$0xff]
  %v154 = vld [vmem:[%s0 + $0x3d0] sm:$0xf]
  %v155 = vld [vmem:[%s0 + $0x3d4] sm:$0xff]
  %v156 = vld [vmem:[%s0 + $0x3dc] sm:$0xff]
  %v157 = vld [vmem:[%s0 + $0x3e4] sm:$0xff]
  %v158 = vld [vmem:[%s0 + $0x3ec] sm:$0xf]
  %v159 = vld [vmem:[%s0 + $0x3f0] sm:$0xff]
  %v160 = vld [vmem:[%s0 + $0x3f8] sm:$0xff]
  %v161 = vld [vmem:[%s0 + $0x400] sm:$0xff]
  %v162 = vld [vmem:[%s0 + $0x408] sm:$0xf]
  %v163 = vld [vmem:[%s0 + $0x40c] sm:$0xff]
  %v164 = vld [vmem:[%s0 + $0x414] sm:$0xff]
  %v165 = vld [vmem:[%s0 + $0x41c] sm:$0xff]
  %v166 = vld [vmem:[%s0 + $0x424] sm:$0xf]
  %v167 = vld [vmem:[%s0 + $0x428] sm:$0xff]
  %v168 = vld [vmem:[%s0 + $0x430] sm:$0xff]
  %v169 = vld [vmem:[%s0 + $0x438] sm:$0xff]
  %v170 = vld [vmem:[%s0 + $0x440] sm:$0xf]
  %v171 = vld [vmem:[%s0 + $0x444] sm:$0xff]
  %v172 = vld [vmem:[%s0 + $0x44c] sm:$0xff]
  %v173 = vld [vmem:[%s0 + $0x454] sm:$0xff]
  %v174 = vld [vmem:[%s0 + $0x45c] sm:$0xf]
  %v175 = vld [vmem:[%s0 + $0x460] sm:$0xff]
  %v176 = vld [vmem:[%s0 + $0x468] sm:$0xff]
  %v177 = vld [vmem:[%s0 + $0x470] sm:$0xff]
  %v178 = vld [vmem:[%s0 + $0x478] sm:$0xf]
  %v179 = vld [vmem:[%s0 + $0x47c] sm:$0xff]
  %v180 = vld [vmem:[%s0 + $0x484] sm:$0xff]
  %v181 = vld [vmem:[%s0 + $0x48c] sm:$0xff]
  %v182 = vld [vmem:[%s0 + $0x494] sm:$0xf]
  %v183 = vld [vmem:[%s0 + $0x498] sm:$0xff]
  %v184 = vld [vmem:[%s0 + $0x4a0] sm:$0xff]
  %v185 = vld [vmem:[%s0 + $0x4a8] sm:$0xff]
  %v186 = vld [vmem:[%s0 + $0x4b0] sm:$0xf]
  %v187 = vld [vmem:[%s0 + $0x4b4] sm:$0xff]
  %v188 = vld [vmem:[%s0 + $0x4bc] sm:$0xff]
  %v189 = vld [vmem:[%s0 + $0x4c4] sm:$0xff]
  %v190 = vld [vmem:[%s0 + $0x4cc] sm:$0xf]
  %v191 = vld [vmem:[%s0 + $0x4d0] sm:$0xff]
  %v192 = vld [vmem:[%s0 + $0x4d8] sm:$0xff]
  %v193 = vld [vmem:[%s0 + $0x4e0] sm:$0xff]
  %v194 = vld [vmem:[%s0 + $0x4e8] sm:$0xf]
  %v195 = vld [vmem:[%s0 + $0x4ec] sm:$0xff]
  %v196 = vld [vmem:[%s0 + $0x4f4] sm:$0xff]
  %v197 = vld [vmem:[%s0 + $0x4fc] sm:$0xff]
  %v198 = vld [vmem:[%s0 + $0x504] sm:$0xf]
  %v199 = vld [vmem:[%s0 + $0x508] sm:$0xff]
  %v200 = vld [vmem:[%s0 + $0x510] sm:$0xff]
  %v201 = vld [vmem:[%s0 + $0x518] sm:$0xff]
  %v202 = vld [vmem:[%s0 + $0x520] sm:$0xf]
  %v203 = vld [vmem:[%s0 + $0x524] sm:$0xff]
  %v204 = vld [vmem:[%s0 + $0x52c] sm:$0xff]
  %v205 = vld [vmem:[%s0 + $0x534] sm:$0xff]
  %v206 = vld [vmem:[%s0 + $0x53c] sm:$0xf]
  %v207 = vld [vmem:[%s0 + $0x540] sm:$0xff]
  %v208 = vld [vmem:[%s0 + $0x548] sm:$0xff]
  %v209 = vld [vmem:[%s0 + $0x550] sm:$0xff]
  %v210 = vld [vmem:[%s0 + $0x558] sm:$0xf]
  %v211 = vld [vmem:[%s0 + $0x55c] sm:$0xff]
  %v212 = vld [vmem:[%s0 + $0x564] sm:$0xff]
  %v213 = vld [vmem:[%s0 + $0x56c] sm:$0xff]
  %v214 = vld [vmem:[%s0 + $0x574] sm:$0xf]
  %v215 = vld [vmem:[%s0 + $0x578] sm:$0xff]
  %v216 = vld [vmem:[%s0 + $0x580] sm:$0xff]
  %v217 = vld [vmem:[%s0 + $0x588] sm:$0xff]
  %v218 = vld [vmem:[%s0 + $0x590] sm:$0xf]
  %v219 = vld [vmem:[%s0 + $0x594] sm:$0xff]
  %v220 = vld [vmem:[%s0 + $0x59c] sm:$0xff]
  %v221 = vld [vmem:[%s0 + $0x5a4] sm:$0xff]
  %v222 = vld [vmem:[%s0 + $0x5ac] sm:$0xf]
  %v223 = vld [vmem:[%s0 + $0x5b0] sm:$0xff]
  %v224 = vld [vmem:[%s0 + $0x5b8] sm:$0xff]
  %v225 = vld [vmem:[%s0 + $0x5c0] sm:$0xff]
  %v226 = vld [vmem:[%s0 + $0x5c8] sm:$0xf]
  %v227 = vld [vmem:[%s0 + $0x5cc] sm:$0xff]
  %v228 = vld [vmem:[%s0 + $0x5d4] sm:$0xff]
  %v229 = vld [vmem:[%s0 + $0x5dc] sm:$0xff]
  %v230 = vld [vmem:[%s0 + $0x5e4] sm:$0xf]
  %v231 = vld [vmem:[%s0 + $0x5e8] sm:$0xff]
  %v232 = vld [vmem:[%s0 + $0x5f0] sm:$0xff]
  %v233 = vld [vmem:[%s0 + $0x5f8] sm:$0xff]
  %v234 = vld [vmem:[%s0 + $0x600] sm:$0xf]
  %v235 = vld [vmem:[%s0 + $0x604] sm:$0xff]
  %v236 = vld [vmem:[%s0 + $0x60c] sm:$0xff]
  %v237 = vld [vmem:[%s0 + $0x614] sm:$0xff]
  %v238 = vld [vmem:[%s0 + $0x61c] sm:$0xf]
  %v239 = vld [vmem:[%s0 + $0x620] sm:$0xff]
  %v240 = vld [vmem:[%s0 + $0x628] sm:$0xff]
  %v241 = vld [vmem:[%s0 + $0x630] sm:$0xff]
  %v242 = vld [vmem:[%s0 + $0x638] sm:$0xf]
  %v243 = vld [vmem:[%s0 + $0x63c] sm:$0xff]
  %v244 = vld [vmem:[%s0 + $0x644] sm:$0xff]
  %v245 = vld [vmem:[%s0 + $0x64c] sm:$0xff]
  %v246 = vld [vmem:[%s0 + $0x654] sm:$0xf]
  %v247 = vld [vmem:[%s0 + $0x658] sm:$0xff]
  %v248 = vld [vmem:[%s0 + $0x660] sm:$0xff]
  %v249 = vld [vmem:[%s0 + $0x668] sm:$0xff]
  %v250 = vld [vmem:[%s0 + $0x670] sm:$0xf]
  %v251 = vld [vmem:[%s0 + $0x674] sm:$0xff]
  %v252 = vld [vmem:[%s0 + $0x67c] sm:$0xff]
  %v253 = vld [vmem:[%s0 + $0x684] sm:$0xff]
  %v254 = vld [vmem:[%s0 + $0x68c] sm:$0xf]
  %v255 = vld [vmem:[%s0 + $0x690] sm:$0xff]
  %v256 = vld [vmem:[%s0 + $0x698] sm:$0xff]
  %v257 = vld [vmem:[%s0 + $0x6a0] sm:$0xff]
  %v258 = vld [vmem:[%s0 + $0x6a8] sm:$0xf]
  %v259 = vld [vmem:[%s0 + $0x6ac] sm:$0xff]
  %v260 = vld [vmem:[%s0 + $0x6b4] sm:$0xff]
  %v261 = vld [vmem:[%s0 + $0x6bc] sm:$0xff]
  %v262 = vld [vmem:[%s0 + $0x6c4] sm:$0xf]
  %v263 = vld [vmem:[%s0 + $0x6c8] sm:$0xff]
  %v264 = vld [vmem:[%s0 + $0x6d0] sm:$0xff]
  %v265 = vld [vmem:[%s0 + $0x6d8] sm:$0xff]
  %v266 = vld [vmem:[%s0 + $0x6e0] sm:$0xf]
  %v267 = vld [vmem:[%s0 + $0x6e4] sm:$0xff]
  %v268 = vld [vmem:[%s0 + $0x6ec] sm:$0xff]
  %v269 = vld [vmem:[%s0 + $0x6f4] sm:$0xff]
  %v270 = vld [vmem:[%s0 + $0x6fc] sm:$0xf]
  %v271 = vld [vmem:[%s0 + $0x700] sm:$0xff]
  %v272 = vld [vmem:[%s0 + $0x708] sm:$0xff]
  %v273 = vld [vmem:[%s0 + $0x710] sm:$0xff]
  %v274 = vld [vmem:[%s0 + $0x718] sm:$0xf]
  %v275 = vld [vmem:[%s0 + $0x71c] sm:$0xff]
  %v276 = vld [vmem:[%s0 + $0x724] sm:$0xff]
  %v277 = vld [vmem:[%s0 + $0x72c] sm:$0xff]
  %v278 = vld [vmem:[%s0 + $0x734] sm:$0xf]
  %v279 = vld [vmem:[%s0 + $0x738] sm:$0xff]
  %v280 = vld [vmem:[%s0 + $0x740] sm:$0xff]
  %v281 = vld [vmem:[%s0 + $0x748] sm:$0xff]
  %v282 = vld [vmem:[%s0 + $0x750] sm:$0xf]
  %v283 = vld [vmem:[%s0 + $0x754] sm:$0xff]
  %v284 = vld [vmem:[%s0 + $0x75c] sm:$0xff]
  %v285 = vld [vmem:[%s0 + $0x764] sm:$0xff]
  %v286 = vld [vmem:[%s0 + $0x76c] sm:$0xf]
  %v287 = vld [vmem:[%s0 + $0x770] sm:$0xff]
  %v288 = vld [vmem:[%s0 + $0x778] sm:$0xff]
  %v289 = vld [vmem:[%s0 + $0x780] sm:$0xff]
  %v290 = vld [vmem:[%s0 + $0x788] sm:$0xf]
  %v291 = vld [vmem:[%s0 + $0x78c] sm:$0xff]
  %v292 = vld [vmem:[%s0 + $0x794] sm:$0xff]
  %v293 = vld [vmem:[%s0 + $0x79c] sm:$0xff]
  %v294 = vld [vmem:[%s0 + $0x7a4] sm:$0xf]
  %v295 = vld [vmem:[%s0 + $0x7a8] sm:$0xff]
  %v296 = vld [vmem:[%s0 + $0x7b0] sm:$0xff]
  %v297 = vld [vmem:[%s0 + $0x7b8] sm:$0xff]
  %v298 = vld [vmem:[%s0 + $0x7c0] sm:$0xf]
  %v299 = vld [vmem:[%s0 + $0x7c4] sm:$0xff]
  %v300 = vld [vmem:[%s0 + $0x7cc] sm:$0xff]
  %v301 = vld [vmem:[%s0 + $0x7d4] sm:$0xff]
  %v302 = vld [vmem:[%s0 + $0x7dc] sm:$0xf]
  %v303 = vld [vmem:[%s0 + $0x7e0] sm:$0xff]
  %v304 = vld [vmem:[%s0 + $0x7e8] sm:$0xff]
  %v305 = vld [vmem:[%s0 + $0x7f0] sm:$0xff]
  %v306 = vld [vmem:[%s0 + $0x7f8] sm:$0xf]
  %v307 = vld [vmem:[%s0 + $0x7fc] sm:$0xff]
  %v308 = vld [vmem:[%s0 + $0x804] sm:$0xff]
  %v309 = vld [vmem:[%s0 + $0x80c] sm:$0xff]
  %v310 = vld [vmem:[%s0 + $0x814] sm:$0xf]
  %v311 = vld [vmem:[%s0 + $0x818] sm:$0xff]
  %v312 = vld [vmem:[%s0 + $0x820] sm:$0xff]
  %v313 = vld [vmem:[%s0 + $0x828] sm:$0xff]
  %v314 = vld [vmem:[%s0 + $0x830] sm:$0xf]
  %v315 = vld [vmem:[%s0 + $0x834] sm:$0xff]
  %v316 = vld [vmem:[%s0 + $0x83c] sm:$0xff]
  %v317 = vld [vmem:[%s0 + $0x844] sm:$0xff]
  %v318 = vld [vmem:[%s0 + $0x84c] sm:$0xf]
  %v319 = vld [vmem:[%s0 + $0x850] sm:$0xff]
  %v320 = vld [vmem:[%s0 + $0x858] sm:$0xff]
  %v321 = vld [vmem:[%s0 + $0x860] sm:$0xff]
  %v322 = vld [vmem:[%s0 + $0x868] sm:$0xf]
  %v323 = vld [vmem:[%s0 + $0x86c] sm:$0xff]
  %v324 = vld [vmem:[%s0 + $0x874] sm:$0xff]
  %v325 = vld [vmem:[%s0 + $0x87c] sm:$0xff]
  %v326 = vld [vmem:[%s0 + $0x884] sm:$0xf]
  %v327 = vld [vmem:[%s0 + $0x888] sm:$0xff]
  %v328 = vld [vmem:[%s0 + $0x890] sm:$0xff]
  %v329 = vld [vmem:[%s0 + $0x898] sm:$0xff]
  %v330 = vld [vmem:[%s0 + $0x8a0] sm:$0xf]
  %v331 = vld [vmem:[%s0 + $0x8a4] sm:$0xff]
  %v332 = vld [vmem:[%s0 + $0x8ac] sm:$0xff]
  %v333 = vld [vmem:[%s0 + $0x8b4] sm:$0xff]
  %v334 = vld [vmem:[%s0 + $0x8bc] sm:$0xf]
  %v335 = vld [vmem:[%s0 + $0x8c0] sm:$0xff]
  %v336 = vld [vmem:[%s0 + $0x8c8] sm:$0xff]
  %v337 = vld [vmem:[%s0 + $0x8d0] sm:$0xff]
  %v338 = vld [vmem:[%s0 + $0x8d8] sm:$0xf]
  %v339 = vld [vmem:[%s0 + $0x8dc] sm:$0xff]
  %v340 = vld [vmem:[%s0 + $0x8e4] sm:$0xff]
  %v341 = vld [vmem:[%s0 + $0x8ec] sm:$0xff]
  %v342 = vld [vmem:[%s0 + $0x8f4] sm:$0xf]
  %v343 = vld [vmem:[%s0 + $0x8f8] sm:$0xff]
  %v344 = vld [vmem:[%s0 + $0x900] sm:$0xff]
  %v345 = vld [vmem:[%s0 + $0x908] sm:$0xff]
  %v346 = vld [vmem:[%s0 + $0x910] sm:$0xf]
  %v347 = vld [vmem:[%s0 + $0x914] sm:$0xff]
  %v348 = vld [vmem:[%s0 + $0x91c] sm:$0xff]
  %v349 = vld [vmem:[%s0 + $0x924] sm:$0xff]
  %v350 = vld [vmem:[%s0 + $0x92c] sm:$0xf]
  %v351 = vld [vmem:[%s0 + $0x930] sm:$0xff]
  %v352 = vld [vmem:[%s0 + $0x938] sm:$0xff]
  %v353 = vld [vmem:[%s0 + $0x940] sm:$0xff]
  %v354 = vld [vmem:[%s0 + $0x948] sm:$0xf]
  %v355 = vld [vmem:[%s0 + $0x94c] sm:$0xff]
  %v356 = vld [vmem:[%s0 + $0x954] sm:$0xff]
  %v357 = vld [vmem:[%s0 + $0x95c] sm:$0xff]
  %v358 = vld [vmem:[%s0 + $0x964] sm:$0xf]
  %v359 = vld [vmem:[%s0 + $0x968] sm:$0xff]
  %v360 = vld [vmem:[%s0 + $0x970] sm:$0xff]
  %v361 = vld [vmem:[%s0 + $0x978] sm:$0xff]
  %v362 = vld [vmem:[%s0 + $0x980] sm:$0xf]
  %v363 = vld [vmem:[%s0 + $0x984] sm:$0xff]
  %v364 = vld [vmem:[%s0 + $0x98c] sm:$0xff]
  %v365 = vld [vmem:[%s0 + $0x994] sm:$0xff]
  %v366 = vld [vmem:[%s0 + $0x99c] sm:$0xf]
  %v367 = vld [vmem:[%s0 + $0x9a0] sm:$0xff]
  %v368 = vld [vmem:[%s0 + $0x9a8] sm:$0xff]
  %v369 = vld [vmem:[%s0 + $0x9b0] sm:$0xff]
  %v370 = vld [vmem:[%s0 + $0x9b8] sm:$0xf]
  %v371 = vld [vmem:[%s0 + $0x9bc] sm:$0xff]
  %v372 = vld [vmem:[%s0 + $0x9c4] sm:$0xff]
  %v373 = vld [vmem:[%s0 + $0x9cc] sm:$0xff]
  %v374 = vld [vmem:[%s0 + $0x9d4] sm:$0xf]
  %v375 = vld [vmem:[%s0 + $0x9d8] sm:$0xff]
  %v376 = vld [vmem:[%s0 + $0x9e0] sm:$0xff]
  %v377 = vld [vmem:[%s0 + $0x9e8] sm:$0xff]
  %v378 = vld [vmem:[%s0 + $0x9f0] sm:$0xf]
  %v379 = vld [vmem:[%s0 + $0x9f4] sm:$0xff]
  %v380 = vld [vmem:[%s0 + $0x9fc] sm:$0xff]
  %v381 = vld [vmem:[%s0 + $0xa04] sm:$0xff]
  %v382 = vld [vmem:[%s0 + $0xa0c] sm:$0xf]
  %v383 = vld [vmem:[%s0 + $0xa10] sm:$0xff]
  %v384 = vld [vmem:[%s0 + $0xa18] sm:$0xff]
  %v385 = vld [vmem:[%s0 + $0xa20] sm:$0xff]
  %v386 = vld [vmem:[%s0 + $0xa28] sm:$0xf]
  %v387 = vld [vmem:[%s0 + $0xa2c] sm:$0xff]
  %v388 = vld [vmem:[%s0 + $0xa34] sm:$0xff]
  %v389 = vld [vmem:[%s0 + $0xa3c] sm:$0xff]
  %v390 = vld [vmem:[%s0 + $0xa44] sm:$0xf]
  %v391 = vld [vmem:[%s0 + $0xa48] sm:$0xff]
  %v392 = vld [vmem:[%s0 + $0xa50] sm:$0xff]
  %v393 = vld [vmem:[%s0 + $0xa58] sm:$0xff]
  %v394 = vld [vmem:[%s0 + $0xa60] sm:$0xf]
  %v395 = vld [vmem:[%s0 + $0xa64] sm:$0xff]
  %v396 = vld [vmem:[%s0 + $0xa6c] sm:$0xff]
  %v397 = vld [vmem:[%s0 + $0xa74] sm:$0xff]
  %v398 = vld [vmem:[%s0 + $0xa7c] sm:$0xf]
  %v399 = vld [vmem:[%s0 + $0xa80] sm:$0xff]
  %v400 = vld [vmem:[%s0 + $0xa88] sm:$0xff]
  %v401 = vld [vmem:[%s0 + $0xa90] sm:$0xff]
  %v402 = vld [vmem:[%s0 + $0xa98] sm:$0xf]
  %v403 = vld [vmem:[%s0 + $0xa9c] sm:$0xff]
  %v404 = vld [vmem:[%s0 + $0xaa4] sm:$0xff]
  %v405 = vld [vmem:[%s0 + $0xaac] sm:$0xff]
  %v406 = vld [vmem:[%s0 + $0xab4] sm:$0xf]
  %v407 = vld [vmem:[%s0 + $0xab8] sm:$0xff]
  %v408 = vld [vmem:[%s0 + $0xac0] sm:$0xff]
  %v409 = vld [vmem:[%s0 + $0xac8] sm:$0xff]
  %v410 = vld [vmem:[%s0 + $0xad0] sm:$0xf]
  %v411 = vld [vmem:[%s0 + $0xad4] sm:$0xff]
  %v412 = vld [vmem:[%s0 + $0xadc] sm:$0xff]
  %v413 = vld [vmem:[%s0 + $0xae4] sm:$0xff]
  %v414 = vld [vmem:[%s0 + $0xaec] sm:$0xf]
  %v415 = vld [vmem:[%s0 + $0xaf0] sm:$0xff]
  %v416 = vld [vmem:[%s0 + $0xaf8] sm:$0xff]
  %v417 = vld [vmem:[%s0 + $0xb00] sm:$0xff]
  %v418 = vld [vmem:[%s0 + $0xb08] sm:$0xf]
  %v419 = vld [vmem:[%s0 + $0xb0c] sm:$0xff]
  %v420 = vld [vmem:[%s0 + $0xb14] sm:$0xff]
  %v421 = vld [vmem:[%s0 + $0xb1c] sm:$0xff]
  %v422 = vld [vmem:[%s0 + $0xb24] sm:$0xf]
  %v423 = vld [vmem:[%s0 + $0xb28] sm:$0xff]
  %v424 = vld [vmem:[%s0 + $0xb30] sm:$0xff]
  %v425 = vld [vmem:[%s0 + $0xb38] sm:$0xff]
  %v426 = vld [vmem:[%s0 + $0xb40] sm:$0xf]
  %v427 = vld [vmem:[%s0 + $0xb44] sm:$0xff]
  %v428 = vld [vmem:[%s0 + $0xb4c] sm:$0xff]
  %v429 = vld [vmem:[%s0 + $0xb54] sm:$0xff]
  %v430 = vld [vmem:[%s0 + $0xb5c] sm:$0xf]
  %v431 = vld [vmem:[%s0 + $0xb60] sm:$0xff]
  %v432 = vld [vmem:[%s0 + $0xb68] sm:$0xff]
  %v433 = vld [vmem:[%s0 + $0xb70] sm:$0xff]
  %v434 = vld [vmem:[%s0 + $0xb78] sm:$0xf]
  %v435 = vld [vmem:[%s0 + $0xb7c] sm:$0xff]
  %v436 = vld [vmem:[%s0 + $0xb84] sm:$0xff]
  %v437 = vld [vmem:[%s0 + $0xb8c] sm:$0xff]
  %v438 = vld [vmem:[%s0 + $0xb94] sm:$0xf]
  %v439 = vld [vmem:[%s0 + $0xb98] sm:$0xff]
  %v440 = vld [vmem:[%s0 + $0xba0] sm:$0xff]
  %v441 = vld [vmem:[%s0 + $0xba8] sm:$0xff]
  %v442 = vld [vmem:[%s0 + $0xbb0] sm:$0xf]
  %v443 = vld [vmem:[%s0 + $0xbb4] sm:$0xff]
  %v444 = vld [vmem:[%s0 + $0xbbc] sm:$0xff]
  %v445 = vld [vmem:[%s0 + $0xbc4] sm:$0xff]
  %v446 = vld [vmem:[%s0 + $0xbcc] sm:$0xf]
  %v447 = vld [vmem:[%s0 + $0xbd0] sm:$0xff]
  %v448 = vld [vmem:[%s0 + $0xbd8] sm:$0xff]
  %v449 = vld [vmem:[%s0 + $0xbe0] sm:$0xff]
  %v450 = vld [vmem:[%s0 + $0xbe8] sm:$0xf]
  %v451 = vld [vmem:[%s0 + $0xbec] sm:$0xff]
  %v452 = vld [vmem:[%s0 + $0xbf4] sm:$0xff]
  %v453 = vld [vmem:[%s0 + $0xbfc] sm:$0xff]
  %v454 = vld [vmem:[%s0 + $0xc04] sm:$0xf]
  %v455 = vld [vmem:[%s0 + $0xc08] sm:$0xff]
  %v456 = vld [vmem:[%s0 + $0xc10] sm:$0xff]
  %v457 = vld [vmem:[%s0 + $0xc18] sm:$0xff]
  %v458 = vld [vmem:[%s0 + $0xc20] sm:$0xf]
  %v459 = vld [vmem:[%s0 + $0xc24] sm:$0xff]
  %v460 = vld [vmem:[%s0 + $0xc2c] sm:$0xff]
  %v461 = vld [vmem:[%s0 + $0xc34] sm:$0xff]
  %v462 = vld [vmem:[%s0 + $0xc3c] sm:$0xf]
  %v463 = vld [vmem:[%s0 + $0xc40] sm:$0xff]
  %v464 = vld [vmem:[%s0 + $0xc48] sm:$0xff]
  %v465 = vld [vmem:[%s0 + $0xc50] sm:$0xff]
  %v466 = vld [vmem:[%s0 + $0xc58] sm:$0xf]
  %v467 = vld [vmem:[%s0 + $0xc5c] sm:$0xff]
  %v468 = vld [vmem:[%s0 + $0xc64] sm:$0xff]
  %v469 = vld [vmem:[%s0 + $0xc6c] sm:$0xff]
  %v470 = vld [vmem:[%s0 + $0xc74] sm:$0xf]
  %v471 = vld [vmem:[%s0 + $0xc78] sm:$0xff]
  %v472 = vld [vmem:[%s0 + $0xc80] sm:$0xff]
  %v473 = vld [vmem:[%s0 + $0xc88] sm:$0xff]
  %v474 = vld [vmem:[%s0 + $0xc90] sm:$0xf]
  %v475 = vld [vmem:[%s0 + $0xc94] sm:$0xff]
  %v476 = vld [vmem:[%s0 + $0xc9c] sm:$0xff]
  %v477 = vld [vmem:[%s0 + $0xca4] sm:$0xff]
  %v478 = vld [vmem:[%s0 + $0xcac] sm:$0xf]
  %v479 = vld [vmem:[%s0 + $0xcb0] sm:$0xff]
  %v480 = vld [vmem:[%s0 + $0xcb8] sm:$0xff]
  %v481 = vld [vmem:[%s0 + $0xcc0] sm:$0xff]
  %v482 = vld [vmem:[%s0 + $0xcc8] sm:$0xf]
  %v483 = vld [vmem:[%s0 + $0xccc] sm:$0xff]
  %v484 = vld [vmem:[%s0 + $0xcd4] sm:$0xff]
  %v485 = vld [vmem:[%s0 + $0xcdc] sm:$0xff]
  %v486 = vld [vmem:[%s0 + $0xce4] sm:$0xf]
  %v487 = vld [vmem:[%s0 + $0xce8] sm:$0xff]
  %v488 = vld [vmem:[%s0 + $0xcf0] sm:$0xff]
  %v489 = vld [vmem:[%s0 + $0xcf8] sm:$0xff]
  %v490 = vld [vmem:[%s0 + $0xd00] sm:$0xf]
  %v491 = vld [vmem:[%s0 + $0xd04] sm:$0xff]
  %v492 = vld [vmem:[%s0 + $0xd0c] sm:$0xff]
  %v493 = vld [vmem:[%s0 + $0xd14] sm:$0xff]
  %v494 = vld [vmem:[%s0 + $0xd1c] sm:$0xf]
  %v495 = vld [vmem:[%s0 + $0xd20] sm:$0xff]
  %v496 = vld [vmem:[%s0 + $0xd28] sm:$0xff]
  %v497 = vld [vmem:[%s0 + $0xd30] sm:$0xff]
  %v498 = vld [vmem:[%s0 + $0xd38] sm:$0xf]
  %v499 = vld [vmem:[%s0 + $0xd3c] sm:$0xff]
  %v500 = vld [vmem:[%s0 + $0xd44] sm:$0xff]
  %v501 = vld [vmem:[%s0 + $0xd4c] sm:$0xff]
  %v502 = vld [vmem:[%s0 + $0xd54] sm:$0xf]
  %v503 = vld [vmem:[%s0 + $0xd58] sm:$0xff]
  %v504 = vld [vmem:[%s0 + $0xd60] sm:$0xff]
  %v505 = vld [vmem:[%s0 + $0xd68] sm:$0xff]
  %v506 = vld [vmem:[%s0 + $0xd70] sm:$0xf]
  %v507 = vld [vmem:[%s0 + $0xd74] sm:$0xff]
  %v508 = vld [vmem:[%s0 + $0xd7c] sm:$0xff]
  %v509 = vld [vmem:[%s0 + $0xd84] sm:$0xff]
  %v510 = vld [vmem:[%s0 + $0xd8c] sm:$0xf]
  %v511 = vld [vmem:[%s0 + $0xd90] sm:$0xff]
  %v512 = vld [vmem:[%s0 + $0xd98] sm:$0xff]
  %v513 = vld [vmem:[%s0 + $0xda0] sm:$0xff]
  %v514 = vld [vmem:[%s0 + $0xda8] sm:$0xf]
  %v515 = vld [vmem:[%s0 + $0xdac] sm:$0xff]
  %v516 = vld [vmem:[%s0 + $0xdb4] sm:$0xff]
  %v517 = vld [vmem:[%s0 + $0xdbc] sm:$0xff]
  %v518 = vld [vmem:[%s0 + $0xdc4] sm:$0xf]
  %v519 = vld [vmem:[%s0 + $0xdc8] sm:$0xff]
  %v520 = vld [vmem:[%s0 + $0xdd0] sm:$0xff]
  %v521 = vld [vmem:[%s0 + $0xdd8] sm:$0xff]
  %v522 = vld [vmem:[%s0 + $0xde0] sm:$0xf]
  %v523 = vld [vmem:[%s0 + $0xde4] sm:$0xff]
  %v524 = vld [vmem:[%s0 + $0xdec] sm:$0xff]
  %v525 = vld [vmem:[%s0 + $0xdf4] sm:$0xff]
  %v526 = vld [vmem:[%s0 + $0xdfc] sm:$0xf]
  %v527 = vld [vmem:[%s1] sm:$0xf]
  %v528 = vld [vmem:[%s1 + $0x4] sm:$0xf]
  %v529 = vld [vmem:[%s1 + $0x8] sm:$0xf]
  %v530 = vld [vmem:[%s1 + $0xc] sm:$0xf]
  %v531 = vld [vmem:[%s1 + $0x10] sm:$0xf]
  %v532 = vld [vmem:[%s1 + $0x14] sm:$0xf]
  %v533 = vld [vmem:[%s1 + $0x18] sm:$0xf]
  %v534 = vld [vmem:[%s1 + $0x1c] sm:$0xf]
  %v535 = vld [vmem:[%s1 + $0x20] sm:$0xf]
  %v536 = vld [vmem:[%s1 + $0x24] sm:$0xf]
  %v537 = vld [vmem:[%s1 + $0x28] sm:$0xf]
  %v538 = vld [vmem:[%s1 + $0x2c] sm:$0xf]
  %v539 = vld [vmem:[%s1 + $0x30] sm:$0xf]
  %v540 = vld [vmem:[%s1 + $0x34] sm:$0xf]
  %v541 = vld [vmem:[%s1 + $0x38] sm:$0xf]
  %v542 = vld [vmem:[%s1 + $0x3c] sm:$0xf]
  %v543 = vld [vmem:[%s1 + $0x40] sm:$0xf]
  %v544 = vld [vmem:[%s1 + $0x44] sm:$0xf]
  %v545 = vld [vmem:[%s1 + $0x48] sm:$0xf]
  %v546 = vld [vmem:[%s1 + $0x4c] sm:$0xf]
  %v547 = vld [vmem:[%s1 + $0x50] sm:$0xf]
  %v548 = vld [vmem:[%s1 + $0x54] sm:$0xf]
  %v549 = vld [vmem:[%s1 + $0x58] sm:$0xf]
  %v550 = vld [vmem:[%s1 + $0x5c] sm:$0xf]
  %v551 = vld [vmem:[%s1 + $0x60] sm:$0xf]
  %v552 = vld [vmem:[%s1 + $0x64] sm:$0xf]
  %v553 = vld [vmem:[%s1 + $0x68] sm:$0xf]
  %v554 = vld [vmem:[%s1 + $0x6c] sm:$0xf]
  %v555 = vld [vmem:[%s1 + $0x70] sm:$0xf]
  %v556 = vld [vmem:[%s1 + $0x74] sm:$0xf]
  %v557 = vld [vmem:[%s1 + $0x78] sm:$0xf]
  %v558 = vld [vmem:[%s1 + $0x7c] sm:$0xf]
  %v559 = vld [vmem:[%s1 + $0x80] sm:$0xf]
  %v560 = vld [vmem:[%s1 + $0x84] sm:$0xf]
  %v561 = vld [vmem:[%s1 + $0x88] sm:$0xf]
  %v562 = vld [vmem:[%s1 + $0x8c] sm:$0xf]
  %v563 = vld [vmem:[%s1 + $0x90] sm:$0xf]
  %v564 = vld [vmem:[%s1 + $0x94] sm:$0xf]
  %v565 = vld [vmem:[%s1 + $0x98] sm:$0xf]
  %v566 = vld [vmem:[%s1 + $0x9c] sm:$0xf]
  %v567 = vld [vmem:[%s1 + $0xa0] sm:$0xf]
  %v568 = vld [vmem:[%s1 + $0xa4] sm:$0xf]
  %v569 = vld [vmem:[%s1 + $0xa8] sm:$0xf]
  %v570 = vld [vmem:[%s1 + $0xac] sm:$0xf]
  %v571 = vld [vmem:[%s1 + $0xb0] sm:$0xf]
  %v572 = vld [vmem:[%s1 + $0xb4] sm:$0xf]
  %v573 = vld [vmem:[%s1 + $0xb8] sm:$0xf]
  %v574 = vld [vmem:[%s1 + $0xbc] sm:$0xf]
  %v575 = vld [vmem:[%s1 + $0xc0] sm:$0xf]
  %v576 = vld [vmem:[%s1 + $0xc4] sm:$0xf]
  %v577 = vld [vmem:[%s1 + $0xc8] sm:$0xf]
  %v578 = vld [vmem:[%s1 + $0xcc] sm:$0xf]
  %v579 = vld [vmem:[%s1 + $0xd0] sm:$0xf]
  %v580 = vld [vmem:[%s1 + $0xd4] sm:$0xf]
  %v581 = vld [vmem:[%s1 + $0xd8] sm:$0xf]
  %v582 = vld [vmem:[%s1 + $0xdc] sm:$0xf]
  %v583 = vld [vmem:[%s1 + $0xe0] sm:$0xf]
  %v584 = vld [vmem:[%s1 + $0xe4] sm:$0xf]
  %v585 = vld [vmem:[%s1 + $0xe8] sm:$0xf]
  %v586 = vld [vmem:[%s1 + $0xec] sm:$0xf]
  %v587 = vld [vmem:[%s1 + $0xf0] sm:$0xf]
  %v588 = vld [vmem:[%s1 + $0xf4] sm:$0xf]
  %v589 = vld [vmem:[%s1 + $0xf8] sm:$0xf]
  %v590 = vld [vmem:[%s1 + $0xfc] sm:$0xf]
  %v591 = vld [vmem:[%s1 + $0x100] sm:$0xf]
  %v592 = vld [vmem:[%s1 + $0x104] sm:$0xf]
  %v593 = vld [vmem:[%s1 + $0x108] sm:$0xf]
  %v594 = vld [vmem:[%s1 + $0x10c] sm:$0xf]
  %v595 = vld [vmem:[%s1 + $0x110] sm:$0xf]
  %v596 = vld [vmem:[%s1 + $0x114] sm:$0xf]
  %v597 = vld [vmem:[%s1 + $0x118] sm:$0xf]
  %v598 = vld [vmem:[%s1 + $0x11c] sm:$0xf]
  %v599 = vld [vmem:[%s1 + $0x120] sm:$0xf]
  %v600 = vld [vmem:[%s1 + $0x124] sm:$0xf]
  %v601 = vld [vmem:[%s1 + $0x128] sm:$0xf]
  %v602 = vld [vmem:[%s1 + $0x12c] sm:$0xf]
  %v603 = vld [vmem:[%s1 + $0x130] sm:$0xf]
  %v604 = vld [vmem:[%s1 + $0x134] sm:$0xf]
  %v605 = vld [vmem:[%s1 + $0x138] sm:$0xf]
  %v606 = vld [vmem:[%s1 + $0x13c] sm:$0xf]
  %v607 = vld [vmem:[%s1 + $0x140] sm:$0xf]
  %v608 = vld [vmem:[%s1 + $0x144] sm:$0xf]
  %v609 = vld [vmem:[%s1 + $0x148] sm:$0xf]
  %v610 = vld [vmem:[%s1 + $0x14c] sm:$0xf]
  %v611 = vld [vmem:[%s1 + $0x150] sm:$0xf]
  %v612 = vld [vmem:[%s1 + $0x154] sm:$0xf]
  %v613 = vld [vmem:[%s1 + $0x158] sm:$0xf]
  %v614 = vld [vmem:[%s1 + $0x15c] sm:$0xf]
  %v615 = vld [vmem:[%s1 + $0x160] sm:$0xf]
  %v616 = vld [vmem:[%s1 + $0x164] sm:$0xf]
  %v617 = vld [vmem:[%s1 + $0x168] sm:$0xf]
  %v618 = vld [vmem:[%s1 + $0x16c] sm:$0xf]
  %v619 = vld [vmem:[%s1 + $0x170] sm:$0xf]
  %v620 = vld [vmem:[%s1 + $0x174] sm:$0xf]
  %v621 = vld [vmem:[%s1 + $0x178] sm:$0xf]
  %v622 = vld [vmem:[%s1 + $0x17c] sm:$0xf]
  %v623 = vld [vmem:[%s1 + $0x180] sm:$0xf]
  %v624 = vld [vmem:[%s1 + $0x184] sm:$0xf]
  %v625 = vld [vmem:[%s1 + $0x188] sm:$0xf]
  %v626 = vld [vmem:[%s1 + $0x18c] sm:$0xf]
  %v627 = vld [vmem:[%s1 + $0x190] sm:$0xf]
  %v628 = vld [vmem:[%s1 + $0x194] sm:$0xf]
  %v629 = vld [vmem:[%s1 + $0x198] sm:$0xf]
  %v630 = vld [vmem:[%s1 + $0x19c] sm:$0xf]
  %v631 = vld [vmem:[%s1 + $0x1a0] sm:$0xf]
  %v632 = vld [vmem:[%s1 + $0x1a4] sm:$0xf]
  %v633 = vld [vmem:[%s1 + $0x1a8] sm:$0xf]
  %v634 = vld [vmem:[%s1 + $0x1ac] sm:$0xf]
  %v635 = vld [vmem:[%s1 + $0x1b0] sm:$0xf]
  %v636 = vld [vmem:[%s1 + $0x1b4] sm:$0xf]
  %v637 = vld [vmem:[%s1 + $0x1b8] sm:$0xf]
  %v638 = vld [vmem:[%s1 + $0x1bc] sm:$0xf]
  %v639 = vld [vmem:[%s2] sm:$0x1]
  %v641 = vlaneseq
  %v642 = vshrl.u32 %v641, 7
  %v643 = vsub.s32 0, %v642
  %v644 = vrot.slane %v639, %v643
  %v1158 = vunpack.c.l.b16 %v15
  %v1159 = vunpack.c.h.b16 %v15
  %v1160 = vunpack.c.l.b16 %v16
  %v1161 = vunpack.c.h.b16 %v16
  %v1162 = vunpack.c.l.b16 %v17
  %v1163 = vunpack.c.h.b16 %v17
  %v1164 = vunpack.c.l.b16 %v18
  %v1165 = vunpack.c.l.b16 %v19
  %v1166 = vunpack.c.h.b16 %v19
  %v1167 = vunpack.c.l.b16 %v20
  %v1168 = vunpack.c.h.b16 %v20
  %v1169 = vunpack.c.l.b16 %v21
  %v1170 = vunpack.c.h.b16 %v21
  %v1171 = vunpack.c.l.b16 %v22
  %v1172 = vunpack.c.l.b16 %v23
  %v1173 = vunpack.c.h.b16 %v23
  %v1174 = vunpack.c.l.b16 %v24
  %v1175 = vunpack.c.h.b16 %v24
  %v1176 = vunpack.c.l.b16 %v25
  %v1177 = vunpack.c.h.b16 %v25
  %v1178 = vunpack.c.l.b16 %v26
  %v1179 = vunpack.c.l.b16 %v27
  %v1180 = vunpack.c.h.b16 %v27
  %v1181 = vunpack.c.l.b16 %v28
  %v1182 = vunpack.c.h.b16 %v28
  %v1183 = vunpack.c.l.b16 %v29
  %v1184 = vunpack.c.h.b16 %v29
  %v1185 = vunpack.c.l.b16 %v30
  %v1186 = vunpack.c.l.b16 %v31
  %v1187 = vunpack.c.h.b16 %v31
  %v1188 = vunpack.c.l.b16 %v32
  %v1189 = vunpack.c.h.b16 %v32
  %v1190 = vunpack.c.l.b16 %v33
  %v1191 = vunpack.c.h.b16 %v33
  %v1192 = vunpack.c.l.b16 %v34
  %v1193 = vunpack.c.l.b16 %v35
  %v1194 = vunpack.c.h.b16 %v35
  %v1195 = vunpack.c.l.b16 %v36
  %v1196 = vunpack.c.h.b16 %v36
  %v1197 = vunpack.c.l.b16 %v37
  %v1198 = vunpack.c.h.b16 %v37
  %v1199 = vunpack.c.l.b16 %v38
  %v1200 = vunpack.c.l.b16 %v39
  %v1201 = vunpack.c.h.b16 %v39
  %v1202 = vunpack.c.l.b16 %v40
  %v1203 = vunpack.c.h.b16 %v40
  %v1204 = vunpack.c.l.b16 %v41
  %v1205 = vunpack.c.h.b16 %v41
  %v1206 = vunpack.c.l.b16 %v42
  %v1207 = vunpack.c.l.b16 %v43
  %v1208 = vunpack.c.h.b16 %v43
  %v1209 = vunpack.c.l.b16 %v44
  %v1210 = vunpack.c.h.b16 %v44
  %v1211 = vunpack.c.l.b16 %v45
  %v1212 = vunpack.c.h.b16 %v45
  %v1213 = vunpack.c.l.b16 %v46
  %v1214 = vunpack.c.l.b16 %v47
  %v1215 = vunpack.c.h.b16 %v47
  %v1216 = vunpack.c.l.b16 %v48
  %v1217 = vunpack.c.h.b16 %v48
  %v1218 = vunpack.c.l.b16 %v49
  %v1219 = vunpack.c.h.b16 %v49
  %v1220 = vunpack.c.l.b16 %v50
  %v1221 = vunpack.c.l.b16 %v51
  %v1222 = vunpack.c.h.b16 %v51
  %v1223 = vunpack.c.l.b16 %v52
  %v1224 = vunpack.c.h.b16 %v52
  %v1225 = vunpack.c.l.b16 %v53
  %v1226 = vunpack.c.h.b16 %v53
  %v1227 = vunpack.c.l.b16 %v54
  %v1228 = vunpack.c.l.b16 %v55
  %v1229 = vunpack.c.h.b16 %v55
  %v1230 = vunpack.c.l.b16 %v56
  %v1231 = vunpack.c.h.b16 %v56
  %v1232 = vunpack.c.l.b16 %v57
  %v1233 = vunpack.c.h.b16 %v57
  %v1234 = vunpack.c.l.b16 %v58
  %v1235 = vunpack.c.l.b16 %v59
  %v1236 = vunpack.c.h.b16 %v59
  %v1237 = vunpack.c.l.b16 %v60
  %v1238 = vunpack.c.h.b16 %v60
  %v1239 = vunpack.c.l.b16 %v61
  %v1240 = vunpack.c.h.b16 %v61
  %v1241 = vunpack.c.l.b16 %v62
  %v1242 = vunpack.c.l.b16 %v63
  %v1243 = vunpack.c.h.b16 %v63
  %v1244 = vunpack.c.l.b16 %v64
  %v1245 = vunpack.c.h.b16 %v64
  %v1246 = vunpack.c.l.b16 %v65
  %v1247 = vunpack.c.h.b16 %v65
  %v1248 = vunpack.c.l.b16 %v66
  %v1249 = vunpack.c.l.b16 %v67
  %v1250 = vunpack.c.h.b16 %v67
  %v1251 = vunpack.c.l.b16 %v68
  %v1252 = vunpack.c.h.b16 %v68
  %v1253 = vunpack.c.l.b16 %v69
  %v1254 = vunpack.c.h.b16 %v69
  %v1255 = vunpack.c.l.b16 %v70
  %v1256 = vunpack.c.l.b16 %v71
  %v1257 = vunpack.c.h.b16 %v71
  %v1258 = vunpack.c.l.b16 %v72
  %v1259 = vunpack.c.h.b16 %v72
  %v1260 = vunpack.c.l.b16 %v73
  %v1261 = vunpack.c.h.b16 %v73
  %v1262 = vunpack.c.l.b16 %v74
  %v1263 = vunpack.c.l.b16 %v75
  %v1264 = vunpack.c.h.b16 %v75
  %v1265 = vunpack.c.l.b16 %v76
  %v1266 = vunpack.c.h.b16 %v76
  %v1267 = vunpack.c.l.b16 %v77
  %v1268 = vunpack.c.h.b16 %v77
  %v1269 = vunpack.c.l.b16 %v78
  %v1270 = vunpack.c.l.b16 %v79
  %v1271 = vunpack.c.h.b16 %v79
  %v1272 = vunpack.c.l.b16 %v80
  %v1273 = vunpack.c.h.b16 %v80
  %v1274 = vunpack.c.l.b16 %v81
  %v1275 = vunpack.c.h.b16 %v81
  %v1276 = vunpack.c.l.b16 %v82
  %v1277 = vunpack.c.l.b16 %v83
  %v1278 = vunpack.c.h.b16 %v83
  %v1279 = vunpack.c.l.b16 %v84
  %v1280 = vunpack.c.h.b16 %v84
  %v1281 = vunpack.c.l.b16 %v85
  %v1282 = vunpack.c.h.b16 %v85
  %v1283 = vunpack.c.l.b16 %v86
  %v1284 = vunpack.c.l.b16 %v87
  %v1285 = vunpack.c.h.b16 %v87
  %v1286 = vunpack.c.l.b16 %v88
  %v1287 = vunpack.c.h.b16 %v88
  %v1288 = vunpack.c.l.b16 %v89
  %v1289 = vunpack.c.h.b16 %v89
  %v1290 = vunpack.c.l.b16 %v90
  %v1291 = vunpack.c.l.b16 %v91
  %v1292 = vunpack.c.h.b16 %v91
  %v1293 = vunpack.c.l.b16 %v92
  %v1294 = vunpack.c.h.b16 %v92
  %v1295 = vunpack.c.l.b16 %v93
  %v1296 = vunpack.c.h.b16 %v93
  %v1297 = vunpack.c.l.b16 %v94
  %v1298 = vunpack.c.l.b16 %v95
  %v1299 = vunpack.c.h.b16 %v95
  %v1300 = vunpack.c.l.b16 %v96
  %v1301 = vunpack.c.h.b16 %v96
  %v1302 = vunpack.c.l.b16 %v97
  %v1303 = vunpack.c.h.b16 %v97
  %v1304 = vunpack.c.l.b16 %v98
  %v1305 = vunpack.c.l.b16 %v99
  %v1306 = vunpack.c.h.b16 %v99
  %v1307 = vunpack.c.l.b16 %v100
  %v1308 = vunpack.c.h.b16 %v100
  %v1309 = vunpack.c.l.b16 %v101
  %v1310 = vunpack.c.h.b16 %v101
  %v1311 = vunpack.c.l.b16 %v102
  %v1312 = vunpack.c.l.b16 %v103
  %v1313 = vunpack.c.h.b16 %v103
  %v1314 = vunpack.c.l.b16 %v104
  %v1315 = vunpack.c.h.b16 %v104
  %v1316 = vunpack.c.l.b16 %v105
  %v1317 = vunpack.c.h.b16 %v105
  %v1318 = vunpack.c.l.b16 %v106
  %v1319 = vunpack.c.l.b16 %v107
  %v1320 = vunpack.c.h.b16 %v107
  %v1321 = vunpack.c.l.b16 %v108
  %v1322 = vunpack.c.h.b16 %v108
  %v1323 = vunpack.c.l.b16 %v109
  %v1324 = vunpack.c.h.b16 %v109
  %v1325 = vunpack.c.l.b16 %v110
  %v1326 = vunpack.c.l.b16 %v111
  %v1327 = vunpack.c.h.b16 %v111
  %v1328 = vunpack.c.l.b16 %v112
  %v1329 = vunpack.c.h.b16 %v112
  %v1330 = vunpack.c.l.b16 %v113
  %v1331 = vunpack.c.h.b16 %v113
  %v1332 = vunpack.c.l.b16 %v114
  %v1333 = vunpack.c.l.b16 %v115
  %v1334 = vunpack.c.h.b16 %v115
  %v1335 = vunpack.c.l.b16 %v116
  %v1336 = vunpack.c.h.b16 %v116
  %v1337 = vunpack.c.l.b16 %v117
  %v1338 = vunpack.c.h.b16 %v117
  %v1339 = vunpack.c.l.b16 %v118
  %v1340 = vunpack.c.l.b16 %v119
  %v1341 = vunpack.c.h.b16 %v119
  %v1342 = vunpack.c.l.b16 %v120
  %v1343 = vunpack.c.h.b16 %v120
  %v1344 = vunpack.c.l.b16 %v121
  %v1345 = vunpack.c.h.b16 %v121
  %v1346 = vunpack.c.l.b16 %v122
  %v1347 = vunpack.c.l.b16 %v123
  %v1348 = vunpack.c.h.b16 %v123
  %v1349 = vunpack.c.l.b16 %v124
  %v1350 = vunpack.c.h.b16 %v124
  %v1351 = vunpack.c.l.b16 %v125
  %v1352 = vunpack.c.h.b16 %v125
  %v1353 = vunpack.c.l.b16 %v126
  %v1354 = vunpack.c.l.b16 %v127
  %v1355 = vunpack.c.h.b16 %v127
  %v1356 = vunpack.c.l.b16 %v128
  %v1357 = vunpack.c.h.b16 %v128
  %v1358 = vunpack.c.l.b16 %v129
  %v1359 = vunpack.c.h.b16 %v129
  %v1360 = vunpack.c.l.b16 %v130
  %v1361 = vunpack.c.l.b16 %v131
  %v1362 = vunpack.c.h.b16 %v131
  %v1363 = vunpack.c.l.b16 %v132
  %v1364 = vunpack.c.h.b16 %v132
  %v1365 = vunpack.c.l.b16 %v133
  %v1366 = vunpack.c.h.b16 %v133
  %v1367 = vunpack.c.l.b16 %v134
  %v1368 = vunpack.c.l.b16 %v135
  %v1369 = vunpack.c.h.b16 %v135
  %v1370 = vunpack.c.l.b16 %v136
  %v1371 = vunpack.c.h.b16 %v136
  %v1372 = vunpack.c.l.b16 %v137
  %v1373 = vunpack.c.h.b16 %v137
  %v1374 = vunpack.c.l.b16 %v138
  %v1375 = vunpack.c.l.b16 %v139
  %v1376 = vunpack.c.h.b16 %v139
  %v1377 = vunpack.c.l.b16 %v140
  %v1378 = vunpack.c.h.b16 %v140
  %v1379 = vunpack.c.l.b16 %v141
  %v1380 = vunpack.c.h.b16 %v141
  %v1381 = vunpack.c.l.b16 %v142
  %v1382 = vunpack.c.l.b16 %v143
  %v1383 = vunpack.c.h.b16 %v143
  %v1384 = vunpack.c.l.b16 %v144
  %v1385 = vunpack.c.h.b16 %v144
  %v1386 = vunpack.c.l.b16 %v145
  %v1387 = vunpack.c.h.b16 %v145
  %v1388 = vunpack.c.l.b16 %v146
  %v1389 = vunpack.c.l.b16 %v147
  %v1390 = vunpack.c.h.b16 %v147
  %v1391 = vunpack.c.l.b16 %v148
  %v1392 = vunpack.c.h.b16 %v148
  %v1393 = vunpack.c.l.b16 %v149
  %v1394 = vunpack.c.h.b16 %v149
  %v1395 = vunpack.c.l.b16 %v150
  %v1396 = vunpack.c.l.b16 %v151
  %v1397 = vunpack.c.h.b16 %v151
  %v1398 = vunpack.c.l.b16 %v152
  %v1399 = vunpack.c.h.b16 %v152
  %v1400 = vunpack.c.l.b16 %v153
  %v1401 = vunpack.c.h.b16 %v153
  %v1402 = vunpack.c.l.b16 %v154
  %v1403 = vunpack.c.l.b16 %v155
  %v1404 = vunpack.c.h.b16 %v155
  %v1405 = vunpack.c.l.b16 %v156
  %v1406 = vunpack.c.h.b16 %v156
  %v1407 = vunpack.c.l.b16 %v157
  %v1408 = vunpack.c.h.b16 %v157
  %v1409 = vunpack.c.l.b16 %v158
  %v1410 = vunpack.c.l.b16 %v159
  %v1411 = vunpack.c.h.b16 %v159
  %v1412 = vunpack.c.l.b16 %v160
  %v1413 = vunpack.c.h.b16 %v160
  %v1414 = vunpack.c.l.b16 %v161
  %v1415 = vunpack.c.h.b16 %v161
  %v1416 = vunpack.c.l.b16 %v162
  %v1417 = vunpack.c.l.b16 %v163
  %v1418 = vunpack.c.h.b16 %v163
  %v1419 = vunpack.c.l.b16 %v164
  %v1420 = vunpack.c.h.b16 %v164
  %v1421 = vunpack.c.l.b16 %v165
  %v1422 = vunpack.c.h.b16 %v165
  %v1423 = vunpack.c.l.b16 %v166
  %v1424 = vunpack.c.l.b16 %v167
  %v1425 = vunpack.c.h.b16 %v167
  %v1426 = vunpack.c.l.b16 %v168
  %v1427 = vunpack.c.h.b16 %v168
  %v1428 = vunpack.c.l.b16 %v169
  %v1429 = vunpack.c.h.b16 %v169
  %v1430 = vunpack.c.l.b16 %v170
  %v1431 = vunpack.c.l.b16 %v171
  %v1432 = vunpack.c.h.b16 %v171
  %v1433 = vunpack.c.l.b16 %v172
  %v1434 = vunpack.c.h.b16 %v172
  %v1435 = vunpack.c.l.b16 %v173
  %v1436 = vunpack.c.h.b16 %v173
  %v1437 = vunpack.c.l.b16 %v174
  %v1438 = vunpack.c.l.b16 %v175
  %v1439 = vunpack.c.h.b16 %v175
  %v1440 = vunpack.c.l.b16 %v176
  %v1441 = vunpack.c.h.b16 %v176
  %v1442 = vunpack.c.l.b16 %v177
  %v1443 = vunpack.c.h.b16 %v177
  %v1444 = vunpack.c.l.b16 %v178
  %v1445 = vunpack.c.l.b16 %v179
  %v1446 = vunpack.c.h.b16 %v179
  %v1447 = vunpack.c.l.b16 %v180
  %v1448 = vunpack.c.h.b16 %v180
  %v1449 = vunpack.c.l.b16 %v181
  %v1450 = vunpack.c.h.b16 %v181
  %v1451 = vunpack.c.l.b16 %v182
  %v1452 = vunpack.c.l.b16 %v183
  %v1453 = vunpack.c.h.b16 %v183
  %v1454 = vunpack.c.l.b16 %v184
  %v1455 = vunpack.c.h.b16 %v184
  %v1456 = vunpack.c.l.b16 %v185
  %v1457 = vunpack.c.h.b16 %v185
  %v1458 = vunpack.c.l.b16 %v186
  %v1459 = vunpack.c.l.b16 %v187
  %v1460 = vunpack.c.h.b16 %v187
  %v1461 = vunpack.c.l.b16 %v188
  %v1462 = vunpack.c.h.b16 %v188
  %v1463 = vunpack.c.l.b16 %v189
  %v1464 = vunpack.c.h.b16 %v189
  %v1465 = vunpack.c.l.b16 %v190
  %v1466 = vunpack.c.l.b16 %v191
  %v1467 = vunpack.c.h.b16 %v191
  %v1468 = vunpack.c.l.b16 %v192
  %v1469 = vunpack.c.h.b16 %v192
  %v1470 = vunpack.c.l.b16 %v193
  %v1471 = vunpack.c.h.b16 %v193
  %v1472 = vunpack.c.l.b16 %v194
  %v1473 = vunpack.c.l.b16 %v195
  %v1474 = vunpack.c.h.b16 %v195
  %v1475 = vunpack.c.l.b16 %v196
  %v1476 = vunpack.c.h.b16 %v196
  %v1477 = vunpack.c.l.b16 %v197
  %v1478 = vunpack.c.h.b16 %v197
  %v1479 = vunpack.c.l.b16 %v198
  %v1480 = vunpack.c.l.b16 %v199
  %v1481 = vunpack.c.h.b16 %v199
  %v1482 = vunpack.c.l.b16 %v200
  %v1483 = vunpack.c.h.b16 %v200
  %v1484 = vunpack.c.l.b16 %v201
  %v1485 = vunpack.c.h.b16 %v201
  %v1486 = vunpack.c.l.b16 %v202
  %v1487 = vunpack.c.l.b16 %v203
  %v1488 = vunpack.c.h.b16 %v203
  %v1489 = vunpack.c.l.b16 %v204
  %v1490 = vunpack.c.h.b16 %v204
  %v1491 = vunpack.c.l.b16 %v205
  %v1492 = vunpack.c.h.b16 %v205
  %v1493 = vunpack.c.l.b16 %v206
  %v1494 = vunpack.c.l.b16 %v207
  %v1495 = vunpack.c.h.b16 %v207
  %v1496 = vunpack.c.l.b16 %v208
  %v1497 = vunpack.c.h.b16 %v208
  %v1498 = vunpack.c.l.b16 %v209
  %v1499 = vunpack.c.h.b16 %v209
  %v1500 = vunpack.c.l.b16 %v210
  %v1501 = vunpack.c.l.b16 %v211
  %v1502 = vunpack.c.h.b16 %v211
  %v1503 = vunpack.c.l.b16 %v212
  %v1504 = vunpack.c.h.b16 %v212
  %v1505 = vunpack.c.l.b16 %v213
  %v1506 = vunpack.c.h.b16 %v213
  %v1507 = vunpack.c.l.b16 %v214
  %v1508 = vunpack.c.l.b16 %v215
  %v1509 = vunpack.c.h.b16 %v215
  %v1510 = vunpack.c.l.b16 %v216
  %v1511 = vunpack.c.h.b16 %v216
  %v1512 = vunpack.c.l.b16 %v217
  %v1513 = vunpack.c.h.b16 %v217
  %v1514 = vunpack.c.l.b16 %v218
  %v1515 = vunpack.c.l.b16 %v219
  %v1516 = vunpack.c.h.b16 %v219
  %v1517 = vunpack.c.l.b16 %v220
  %v1518 = vunpack.c.h.b16 %v220
  %v1519 = vunpack.c.l.b16 %v221
  %v1520 = vunpack.c.h.b16 %v221
  %v1521 = vunpack.c.l.b16 %v222
  %v1522 = vunpack.c.l.b16 %v223
  %v1523 = vunpack.c.h.b16 %v223
  %v1524 = vunpack.c.l.b16 %v224
  %v1525 = vunpack.c.h.b16 %v224
  %v1526 = vunpack.c.l.b16 %v225
  %v1527 = vunpack.c.h.b16 %v225
  %v1528 = vunpack.c.l.b16 %v226
  %v1529 = vunpack.c.l.b16 %v227
  %v1530 = vunpack.c.h.b16 %v227
  %v1531 = vunpack.c.l.b16 %v228
  %v1532 = vunpack.c.h.b16 %v228
  %v1533 = vunpack.c.l.b16 %v229
  %v1534 = vunpack.c.h.b16 %v229
  %v1535 = vunpack.c.l.b16 %v230
  %v1536 = vunpack.c.l.b16 %v231
  %v1537 = vunpack.c.h.b16 %v231
  %v1538 = vunpack.c.l.b16 %v232
  %v1539 = vunpack.c.h.b16 %v232
  %v1540 = vunpack.c.l.b16 %v233
  %v1541 = vunpack.c.h.b16 %v233
  %v1542 = vunpack.c.l.b16 %v234
  %v1543 = vunpack.c.l.b16 %v235
  %v1544 = vunpack.c.h.b16 %v235
  %v1545 = vunpack.c.l.b16 %v236
  %v1546 = vunpack.c.h.b16 %v236
  %v1547 = vunpack.c.l.b16 %v237
  %v1548 = vunpack.c.h.b16 %v237
  %v1549 = vunpack.c.l.b16 %v238
  %v1550 = vunpack.c.l.b16 %v239
  %v1551 = vunpack.c.h.b16 %v239
  %v1552 = vunpack.c.l.b16 %v240
  %v1553 = vunpack.c.h.b16 %v240
  %v1554 = vunpack.c.l.b16 %v241
  %v1555 = vunpack.c.h.b16 %v241
  %v1556 = vunpack.c.l.b16 %v242
  %v1557 = vunpack.c.l.b16 %v243
  %v1558 = vunpack.c.h.b16 %v243
  %v1559 = vunpack.c.l.b16 %v244
  %v1560 = vunpack.c.h.b16 %v244
  %v1561 = vunpack.c.l.b16 %v245
  %v1562 = vunpack.c.h.b16 %v245
  %v1563 = vunpack.c.l.b16 %v246
  %v1564 = vunpack.c.l.b16 %v247
  %v1565 = vunpack.c.h.b16 %v247
  %v1566 = vunpack.c.l.b16 %v248
  %v1567 = vunpack.c.h.b16 %v248
  %v1568 = vunpack.c.l.b16 %v249
  %v1569 = vunpack.c.h.b16 %v249
  %v1570 = vunpack.c.l.b16 %v250
  %v1571 = vunpack.c.l.b16 %v251
  %v1572 = vunpack.c.h.b16 %v251
  %v1573 = vunpack.c.l.b16 %v252
  %v1574 = vunpack.c.h.b16 %v252
  %v1575 = vunpack.c.l.b16 %v253
  %v1576 = vunpack.c.h.b16 %v253
  %v1577 = vunpack.c.l.b16 %v254
  %v1578 = vunpack.c.l.b16 %v255
  %v1579 = vunpack.c.h.b16 %v255
  %v1580 = vunpack.c.l.b16 %v256
  %v1581 = vunpack.c.h.b16 %v256
  %v1582 = vunpack.c.l.b16 %v257
  %v1583 = vunpack.c.h.b16 %v257
  %v1584 = vunpack.c.l.b16 %v258
  %v1585 = vunpack.c.l.b16 %v259
  %v1586 = vunpack.c.h.b16 %v259
  %v1587 = vunpack.c.l.b16 %v260
  %v1588 = vunpack.c.h.b16 %v260
  %v1589 = vunpack.c.l.b16 %v261
  %v1590 = vunpack.c.h.b16 %v261
  %v1591 = vunpack.c.l.b16 %v262
  %v1592 = vunpack.c.l.b16 %v263
  %v1593 = vunpack.c.h.b16 %v263
  %v1594 = vunpack.c.l.b16 %v264
  %v1595 = vunpack.c.h.b16 %v264
  %v1596 = vunpack.c.l.b16 %v265
  %v1597 = vunpack.c.h.b16 %v265
  %v1598 = vunpack.c.l.b16 %v266
  %v1599 = vunpack.c.l.b16 %v267
  %v1600 = vunpack.c.h.b16 %v267
  %v1601 = vunpack.c.l.b16 %v268
  %v1602 = vunpack.c.h.b16 %v268
  %v1603 = vunpack.c.l.b16 %v269
  %v1604 = vunpack.c.h.b16 %v269
  %v1605 = vunpack.c.l.b16 %v270
  %v1606 = vunpack.c.l.b16 %v271
  %v1607 = vunpack.c.h.b16 %v271
  %v1608 = vunpack.c.l.b16 %v272
  %v1609 = vunpack.c.h.b16 %v272
  %v1610 = vunpack.c.l.b16 %v273
  %v1611 = vunpack.c.h.b16 %v273
  %v1612 = vunpack.c.l.b16 %v274
  %v1613 = vunpack.c.l.b16 %v275
  %v1614 = vunpack.c.h.b16 %v275
  %v1615 = vunpack.c.l.b16 %v276
  %v1616 = vunpack.c.h.b16 %v276
  %v1617 = vunpack.c.l.b16 %v277
  %v1618 = vunpack.c.h.b16 %v277
  %v1619 = vunpack.c.l.b16 %v278
  %v1620 = vunpack.c.l.b16 %v279
  %v1621 = vunpack.c.h.b16 %v279
  %v1622 = vunpack.c.l.b16 %v280
  %v1623 = vunpack.c.h.b16 %v280
  %v1624 = vunpack.c.l.b16 %v281
  %v1625 = vunpack.c.h.b16 %v281
  %v1626 = vunpack.c.l.b16 %v282
  %v1627 = vunpack.c.l.b16 %v283
  %v1628 = vunpack.c.h.b16 %v283
  %v1629 = vunpack.c.l.b16 %v284
  %v1630 = vunpack.c.h.b16 %v284
  %v1631 = vunpack.c.l.b16 %v285
  %v1632 = vunpack.c.h.b16 %v285
  %v1633 = vunpack.c.l.b16 %v286
  %v1634 = vunpack.c.l.b16 %v287
  %v1635 = vunpack.c.h.b16 %v287
  %v1636 = vunpack.c.l.b16 %v288
  %v1637 = vunpack.c.h.b16 %v288
  %v1638 = vunpack.c.l.b16 %v289
  %v1639 = vunpack.c.h.b16 %v289
  %v1640 = vunpack.c.l.b16 %v290
  %v1641 = vunpack.c.l.b16 %v291
  %v1642 = vunpack.c.h.b16 %v291
  %v1643 = vunpack.c.l.b16 %v292
  %v1644 = vunpack.c.h.b16 %v292
  %v1645 = vunpack.c.l.b16 %v293
  %v1646 = vunpack.c.h.b16 %v293
  %v1647 = vunpack.c.l.b16 %v294
  %v1648 = vunpack.c.l.b16 %v295
  %v1649 = vunpack.c.h.b16 %v295
  %v1650 = vunpack.c.l.b16 %v296
  %v1651 = vunpack.c.h.b16 %v296
  %v1652 = vunpack.c.l.b16 %v297
  %v1653 = vunpack.c.h.b16 %v297
  %v1654 = vunpack.c.l.b16 %v298
  %v1655 = vunpack.c.l.b16 %v299
  %v1656 = vunpack.c.h.b16 %v299
  %v1657 = vunpack.c.l.b16 %v300
  %v1658 = vunpack.c.h.b16 %v300
  %v1659 = vunpack.c.l.b16 %v301
  %v1660 = vunpack.c.h.b16 %v301
  %v1661 = vunpack.c.l.b16 %v302
  %v1662 = vunpack.c.l.b16 %v303
  %v1663 = vunpack.c.h.b16 %v303
  %v1664 = vunpack.c.l.b16 %v304
  %v1665 = vunpack.c.h.b16 %v304
  %v1666 = vunpack.c.l.b16 %v305
  %v1667 = vunpack.c.h.b16 %v305
  %v1668 = vunpack.c.l.b16 %v306
  %v1669 = vunpack.c.l.b16 %v307
  %v1670 = vunpack.c.h.b16 %v307
  %v1671 = vunpack.c.l.b16 %v308
  %v1672 = vunpack.c.h.b16 %v308
  %v1673 = vunpack.c.l.b16 %v309
  %v1674 = vunpack.c.h.b16 %v309
  %v1675 = vunpack.c.l.b16 %v310
  %v1676 = vunpack.c.l.b16 %v311
  %v1677 = vunpack.c.h.b16 %v311
  %v1678 = vunpack.c.l.b16 %v312
  %v1679 = vunpack.c.h.b16 %v312
  %v1680 = vunpack.c.l.b16 %v313
  %v1681 = vunpack.c.h.b16 %v313
  %v1682 = vunpack.c.l.b16 %v314
  %v1683 = vunpack.c.l.b16 %v315
  %v1684 = vunpack.c.h.b16 %v315
  %v1685 = vunpack.c.l.b16 %v316
  %v1686 = vunpack.c.h.b16 %v316
  %v1687 = vunpack.c.l.b16 %v317
  %v1688 = vunpack.c.h.b16 %v317
  %v1689 = vunpack.c.l.b16 %v318
  %v1690 = vunpack.c.l.b16 %v319
  %v1691 = vunpack.c.h.b16 %v319
  %v1692 = vunpack.c.l.b16 %v320
  %v1693 = vunpack.c.h.b16 %v320
  %v1694 = vunpack.c.l.b16 %v321
  %v1695 = vunpack.c.h.b16 %v321
  %v1696 = vunpack.c.l.b16 %v322
  %v1697 = vunpack.c.l.b16 %v323
  %v1698 = vunpack.c.h.b16 %v323
  %v1699 = vunpack.c.l.b16 %v324
  %v1700 = vunpack.c.h.b16 %v324
  %v1701 = vunpack.c.l.b16 %v325
  %v1702 = vunpack.c.h.b16 %v325
  %v1703 = vunpack.c.l.b16 %v326
  %v1704 = vunpack.c.l.b16 %v327
  %v1705 = vunpack.c.h.b16 %v327
  %v1706 = vunpack.c.l.b16 %v328
  %v1707 = vunpack.c.h.b16 %v328
  %v1708 = vunpack.c.l.b16 %v329
  %v1709 = vunpack.c.h.b16 %v329
  %v1710 = vunpack.c.l.b16 %v330
  %v1711 = vunpack.c.l.b16 %v331
  %v1712 = vunpack.c.h.b16 %v331
  %v1713 = vunpack.c.l.b16 %v332
  %v1714 = vunpack.c.h.b16 %v332
  %v1715 = vunpack.c.l.b16 %v333
  %v1716 = vunpack.c.h.b16 %v333
  %v1717 = vunpack.c.l.b16 %v334
  %v1718 = vunpack.c.l.b16 %v335
  %v1719 = vunpack.c.h.b16 %v335
  %v1720 = vunpack.c.l.b16 %v336
  %v1721 = vunpack.c.h.b16 %v336
  %v1722 = vunpack.c.l.b16 %v337
  %v1723 = vunpack.c.h.b16 %v337
  %v1724 = vunpack.c.l.b16 %v338
  %v1725 = vunpack.c.l.b16 %v339
  %v1726 = vunpack.c.h.b16 %v339
  %v1727 = vunpack.c.l.b16 %v340
  %v1728 = vunpack.c.h.b16 %v340
  %v1729 = vunpack.c.l.b16 %v341
  %v1730 = vunpack.c.h.b16 %v341
  %v1731 = vunpack.c.l.b16 %v342
  %v1732 = vunpack.c.l.b16 %v343
  %v1733 = vunpack.c.h.b16 %v343
  %v1734 = vunpack.c.l.b16 %v344
  %v1735 = vunpack.c.h.b16 %v344
  %v1736 = vunpack.c.l.b16 %v345
  %v1737 = vunpack.c.h.b16 %v345
  %v1738 = vunpack.c.l.b16 %v346
  %v1739 = vunpack.c.l.b16 %v347
  %v1740 = vunpack.c.h.b16 %v347
  %v1741 = vunpack.c.l.b16 %v348
  %v1742 = vunpack.c.h.b16 %v348
  %v1743 = vunpack.c.l.b16 %v349
  %v1744 = vunpack.c.h.b16 %v349
  %v1745 = vunpack.c.l.b16 %v350
  %v1746 = vunpack.c.l.b16 %v351
  %v1747 = vunpack.c.h.b16 %v351
  %v1748 = vunpack.c.l.b16 %v352
  %v1749 = vunpack.c.h.b16 %v352
  %v1750 = vunpack.c.l.b16 %v353
  %v1751 = vunpack.c.h.b16 %v353
  %v1752 = vunpack.c.l.b16 %v354
  %v1753 = vunpack.c.l.b16 %v355
  %v1754 = vunpack.c.h.b16 %v355
  %v1755 = vunpack.c.l.b16 %v356
  %v1756 = vunpack.c.h.b16 %v356
  %v1757 = vunpack.c.l.b16 %v357
  %v1758 = vunpack.c.h.b16 %v357
  %v1759 = vunpack.c.l.b16 %v358
  %v1760 = vunpack.c.l.b16 %v359
  %v1761 = vunpack.c.h.b16 %v359
  %v1762 = vunpack.c.l.b16 %v360
  %v1763 = vunpack.c.h.b16 %v360
  %v1764 = vunpack.c.l.b16 %v361
  %v1765 = vunpack.c.h.b16 %v361
  %v1766 = vunpack.c.l.b16 %v362
  %v1767 = vunpack.c.l.b16 %v363
  %v1768 = vunpack.c.h.b16 %v363
  %v1769 = vunpack.c.l.b16 %v364
  %v1770 = vunpack.c.h.b16 %v364
  %v1771 = vunpack.c.l.b16 %v365
  %v1772 = vunpack.c.h.b16 %v365
  %v1773 = vunpack.c.l.b16 %v366
  %v1774 = vunpack.c.l.b16 %v367
  %v1775 = vunpack.c.h.b16 %v367
  %v1776 = vunpack.c.l.b16 %v368
  %v1777 = vunpack.c.h.b16 %v368
  %v1778 = vunpack.c.l.b16 %v369
  %v1779 = vunpack.c.h.b16 %v369
  %v1780 = vunpack.c.l.b16 %v370
  %v1781 = vunpack.c.l.b16 %v371
  %v1782 = vunpack.c.h.b16 %v371
  %v1783 = vunpack.c.l.b16 %v372
  %v1784 = vunpack.c.h.b16 %v372
  %v1785 = vunpack.c.l.b16 %v373
  %v1786 = vunpack.c.h.b16 %v373
  %v1787 = vunpack.c.l.b16 %v374
  %v1788 = vunpack.c.l.b16 %v375
  %v1789 = vunpack.c.h.b16 %v375
  %v1790 = vunpack.c.l.b16 %v376
  %v1791 = vunpack.c.h.b16 %v376
  %v1792 = vunpack.c.l.b16 %v377
  %v1793 = vunpack.c.h.b16 %v377
  %v1794 = vunpack.c.l.b16 %v378
  %v1795 = vunpack.c.l.b16 %v379
  %v1796 = vunpack.c.h.b16 %v379
  %v1797 = vunpack.c.l.b16 %v380
  %v1798 = vunpack.c.h.b16 %v380
  %v1799 = vunpack.c.l.b16 %v381
  %v1800 = vunpack.c.h.b16 %v381
  %v1801 = vunpack.c.l.b16 %v382
  %v1802 = vunpack.c.l.b16 %v383
  %v1803 = vunpack.c.h.b16 %v383
  %v1804 = vunpack.c.l.b16 %v384
  %v1805 = vunpack.c.h.b16 %v384
  %v1806 = vunpack.c.l.b16 %v385
  %v1807 = vunpack.c.h.b16 %v385
  %v1808 = vunpack.c.l.b16 %v386
  %v1809 = vunpack.c.l.b16 %v387
  %v1810 = vunpack.c.h.b16 %v387
  %v1811 = vunpack.c.l.b16 %v388
  %v1812 = vunpack.c.h.b16 %v388
  %v1813 = vunpack.c.l.b16 %v389
  %v1814 = vunpack.c.h.b16 %v389
  %v1815 = vunpack.c.l.b16 %v390
  %v1816 = vunpack.c.l.b16 %v391
  %v1817 = vunpack.c.h.b16 %v391
  %v1818 = vunpack.c.l.b16 %v392
  %v1819 = vunpack.c.h.b16 %v392
  %v1820 = vunpack.c.l.b16 %v393
  %v1821 = vunpack.c.h.b16 %v393
  %v1822 = vunpack.c.l.b16 %v394
  %v1823 = vunpack.c.l.b16 %v395
  %v1824 = vunpack.c.h.b16 %v395
  %v1825 = vunpack.c.l.b16 %v396
  %v1826 = vunpack.c.h.b16 %v396
  %v1827 = vunpack.c.l.b16 %v397
  %v1828 = vunpack.c.h.b16 %v397
  %v1829 = vunpack.c.l.b16 %v398
  %v1830 = vunpack.c.l.b16 %v399
  %v1831 = vunpack.c.h.b16 %v399
  %v1832 = vunpack.c.l.b16 %v400
  %v1833 = vunpack.c.h.b16 %v400
  %v1834 = vunpack.c.l.b16 %v401
  %v1835 = vunpack.c.h.b16 %v401
  %v1836 = vunpack.c.l.b16 %v402
  %v1837 = vunpack.c.l.b16 %v403
  %v1838 = vunpack.c.h.b16 %v403
  %v1839 = vunpack.c.l.b16 %v404
  %v1840 = vunpack.c.h.b16 %v404
  %v1841 = vunpack.c.l.b16 %v405
  %v1842 = vunpack.c.h.b16 %v405
  %v1843 = vunpack.c.l.b16 %v406
  %v1844 = vunpack.c.l.b16 %v407
  %v1845 = vunpack.c.h.b16 %v407
  %v1846 = vunpack.c.l.b16 %v408
  %v1847 = vunpack.c.h.b16 %v408
  %v1848 = vunpack.c.l.b16 %v409
  %v1849 = vunpack.c.h.b16 %v409
  %v1850 = vunpack.c.l.b16 %v410
  %v1851 = vunpack.c.l.b16 %v411
  %v1852 = vunpack.c.h.b16 %v411
  %v1853 = vunpack.c.l.b16 %v412
  %v1854 = vunpack.c.h.b16 %v412
  %v1855 = vunpack.c.l.b16 %v413
  %v1856 = vunpack.c.h.b16 %v413
  %v1857 = vunpack.c.l.b16 %v414
  %v1858 = vunpack.c.l.b16 %v415
  %v1859 = vunpack.c.h.b16 %v415
  %v1860 = vunpack.c.l.b16 %v416
  %v1861 = vunpack.c.h.b16 %v416
  %v1862 = vunpack.c.l.b16 %v417
  %v1863 = vunpack.c.h.b16 %v417
  %v1864 = vunpack.c.l.b16 %v418
  %v1865 = vunpack.c.l.b16 %v419
  %v1866 = vunpack.c.h.b16 %v419
  %v1867 = vunpack.c.l.b16 %v420
  %v1868 = vunpack.c.h.b16 %v420
  %v1869 = vunpack.c.l.b16 %v421
  %v1870 = vunpack.c.h.b16 %v421
  %v1871 = vunpack.c.l.b16 %v422
  %v1872 = vunpack.c.l.b16 %v423
  %v1873 = vunpack.c.h.b16 %v423
  %v1874 = vunpack.c.l.b16 %v424
  %v1875 = vunpack.c.h.b16 %v424
  %v1876 = vunpack.c.l.b16 %v425
  %v1877 = vunpack.c.h.b16 %v425
  %v1878 = vunpack.c.l.b16 %v426
  %v1879 = vunpack.c.l.b16 %v427
  %v1880 = vunpack.c.h.b16 %v427
  %v1881 = vunpack.c.l.b16 %v428
  %v1882 = vunpack.c.h.b16 %v428
  %v1883 = vunpack.c.l.b16 %v429
  %v1884 = vunpack.c.h.b16 %v429
  %v1885 = vunpack.c.l.b16 %v430
  %v1886 = vunpack.c.l.b16 %v431
  %v1887 = vunpack.c.h.b16 %v431
  %v1888 = vunpack.c.l.b16 %v432
  %v1889 = vunpack.c.h.b16 %v432
  %v1890 = vunpack.c.l.b16 %v433
  %v1891 = vunpack.c.h.b16 %v433
  %v1892 = vunpack.c.l.b16 %v434
  %v1893 = vunpack.c.l.b16 %v435
  %v1894 = vunpack.c.h.b16 %v435
  %v1895 = vunpack.c.l.b16 %v436
  %v1896 = vunpack.c.h.b16 %v436
  %v1897 = vunpack.c.l.b16 %v437
  %v1898 = vunpack.c.h.b16 %v437
  %v1899 = vunpack.c.l.b16 %v438
  %v1900 = vunpack.c.l.b16 %v439
  %v1901 = vunpack.c.h.b16 %v439
  %v1902 = vunpack.c.l.b16 %v440
  %v1903 = vunpack.c.h.b16 %v440
  %v1904 = vunpack.c.l.b16 %v441
  %v1905 = vunpack.c.h.b16 %v441
  %v1906 = vunpack.c.l.b16 %v442
  %v1907 = vunpack.c.l.b16 %v443
  %v1908 = vunpack.c.h.b16 %v443
  %v1909 = vunpack.c.l.b16 %v444
  %v1910 = vunpack.c.h.b16 %v444
  %v1911 = vunpack.c.l.b16 %v445
  %v1912 = vunpack.c.h.b16 %v445
  %v1913 = vunpack.c.l.b16 %v446
  %v1914 = vunpack.c.l.b16 %v447
  %v1915 = vunpack.c.h.b16 %v447
  %v1916 = vunpack.c.l.b16 %v448
  %v1917 = vunpack.c.h.b16 %v448
  %v1918 = vunpack.c.l.b16 %v449
  %v1919 = vunpack.c.h.b16 %v449
  %v1920 = vunpack.c.l.b16 %v450
  %v1921 = vunpack.c.l.b16 %v451
  %v1922 = vunpack.c.h.b16 %v451
  %v1923 = vunpack.c.l.b16 %v452
  %v1924 = vunpack.c.h.b16 %v452
  %v1925 = vunpack.c.l.b16 %v453
  %v1926 = vunpack.c.h.b16 %v453
  %v1927 = vunpack.c.l.b16 %v454
  %v1928 = vunpack.c.l.b16 %v455
  %v1929 = vunpack.c.h.b16 %v455
  %v1930 = vunpack.c.l.b16 %v456
  %v1931 = vunpack.c.h.b16 %v456
  %v1932 = vunpack.c.l.b16 %v457
  %v1933 = vunpack.c.h.b16 %v457
  %v1934 = vunpack.c.l.b16 %v458
  %v1935 = vunpack.c.l.b16 %v459
  %v1936 = vunpack.c.h.b16 %v459
  %v1937 = vunpack.c.l.b16 %v460
  %v1938 = vunpack.c.h.b16 %v460
  %v1939 = vunpack.c.l.b16 %v461
  %v1940 = vunpack.c.h.b16 %v461
  %v1941 = vunpack.c.l.b16 %v462
  %v1942 = vunpack.c.l.b16 %v463
  %v1943 = vunpack.c.h.b16 %v463
  %v1944 = vunpack.c.l.b16 %v464
  %v1945 = vunpack.c.h.b16 %v464
  %v1946 = vunpack.c.l.b16 %v465
  %v1947 = vunpack.c.h.b16 %v465
  %v1948 = vunpack.c.l.b16 %v466
  %v1949 = vunpack.c.l.b16 %v467
  %v1950 = vunpack.c.h.b16 %v467
  %v1951 = vunpack.c.l.b16 %v468
  %v1952 = vunpack.c.h.b16 %v468
  %v1953 = vunpack.c.l.b16 %v469
  %v1954 = vunpack.c.h.b16 %v469
  %v1955 = vunpack.c.l.b16 %v470
  %v1956 = vunpack.c.l.b16 %v471
  %v1957 = vunpack.c.h.b16 %v471
  %v1958 = vunpack.c.l.b16 %v472
  %v1959 = vunpack.c.h.b16 %v472
  %v1960 = vunpack.c.l.b16 %v473
  %v1961 = vunpack.c.h.b16 %v473
  %v1962 = vunpack.c.l.b16 %v474
  %v1963 = vunpack.c.l.b16 %v475
  %v1964 = vunpack.c.h.b16 %v475
  %v1965 = vunpack.c.l.b16 %v476
  %v1966 = vunpack.c.h.b16 %v476
  %v1967 = vunpack.c.l.b16 %v477
  %v1968 = vunpack.c.h.b16 %v477
  %v1969 = vunpack.c.l.b16 %v478
  %v1970 = vunpack.c.l.b16 %v479
  %v1971 = vunpack.c.h.b16 %v479
  %v1972 = vunpack.c.l.b16 %v480
  %v1973 = vunpack.c.h.b16 %v480
  %v1974 = vunpack.c.l.b16 %v481
  %v1975 = vunpack.c.h.b16 %v481
  %v1976 = vunpack.c.l.b16 %v482
  %v1977 = vunpack.c.l.b16 %v483
  %v1978 = vunpack.c.h.b16 %v483
  %v1979 = vunpack.c.l.b16 %v484
  %v1980 = vunpack.c.h.b16 %v484
  %v1981 = vunpack.c.l.b16 %v485
  %v1982 = vunpack.c.h.b16 %v485
  %v1983 = vunpack.c.l.b16 %v486
  %v1984 = vunpack.c.l.b16 %v487
  %v1985 = vunpack.c.h.b16 %v487
  %v1986 = vunpack.c.l.b16 %v488
  %v1987 = vunpack.c.h.b16 %v488
  %v1988 = vunpack.c.l.b16 %v489
  %v1989 = vunpack.c.h.b16 %v489
  %v1990 = vunpack.c.l.b16 %v490
  %v1991 = vunpack.c.l.b16 %v491
  %v1992 = vunpack.c.h.b16 %v491
  %v1993 = vunpack.c.l.b16 %v492
  %v1994 = vunpack.c.h.b16 %v492
  %v1995 = vunpack.c.l.b16 %v493
  %v1996 = vunpack.c.h.b16 %v493
  %v1997 = vunpack.c.l.b16 %v494
  %v1998 = vunpack.c.l.b16 %v495
  %v1999 = vunpack.c.h.b16 %v495
  %v2000 = vunpack.c.l.b16 %v496
  %v2001 = vunpack.c.h.b16 %v496
  %v2002 = vunpack.c.l.b16 %v497
  %v2003 = vunpack.c.h.b16 %v497
  %v2004 = vunpack.c.l.b16 %v498
  %v2005 = vunpack.c.l.b16 %v499
  %v2006 = vunpack.c.h.b16 %v499
  %v2007 = vunpack.c.l.b16 %v500
  %v2008 = vunpack.c.h.b16 %v500
  %v2009 = vunpack.c.l.b16 %v501
  %v2010 = vunpack.c.h.b16 %v501
  %v2011 = vunpack.c.l.b16 %v502
  %v2012 = vunpack.c.l.b16 %v503
  %v2013 = vunpack.c.h.b16 %v503
  %v2014 = vunpack.c.l.b16 %v504
  %v2015 = vunpack.c.h.b16 %v504
  %v2016 = vunpack.c.l.b16 %v505
  %v2017 = vunpack.c.h.b16 %v505
  %v2018 = vunpack.c.l.b16 %v506
  %v2019 = vunpack.c.l.b16 %v507
  %v2020 = vunpack.c.h.b16 %v507
  %v2021 = vunpack.c.l.b16 %v508
  %v2022 = vunpack.c.h.b16 %v508
  %v2023 = vunpack.c.l.b16 %v509
  %v2024 = vunpack.c.h.b16 %v509
  %v2025 = vunpack.c.l.b16 %v510
  %v2026 = vunpack.c.l.b16 %v511
  %v2027 = vunpack.c.h.b16 %v511
  %v2028 = vunpack.c.l.b16 %v512
  %v2029 = vunpack.c.h.b16 %v512
  %v2030 = vunpack.c.l.b16 %v513
  %v2031 = vunpack.c.h.b16 %v513
  %v2032 = vunpack.c.l.b16 %v514
  %v2033 = vunpack.c.l.b16 %v515
  %v2034 = vunpack.c.h.b16 %v515
  %v2035 = vunpack.c.l.b16 %v516
  %v2036 = vunpack.c.h.b16 %v516
  %v2037 = vunpack.c.l.b16 %v517
  %v2038 = vunpack.c.h.b16 %v517
  %v2039 = vunpack.c.l.b16 %v518
  %v2040 = vunpack.c.l.b16 %v519
  %v2041 = vunpack.c.h.b16 %v519
  %v2042 = vunpack.c.l.b16 %v520
  %v2043 = vunpack.c.h.b16 %v520
  %v2044 = vunpack.c.l.b16 %v521
  %v2045 = vunpack.c.h.b16 %v521
  %v2046 = vunpack.c.l.b16 %v522
  %v2047 = vunpack.c.l.b16 %v523
  %v2048 = vunpack.c.h.b16 %v523
  %v2049 = vunpack.c.l.b16 %v524
  %v2050 = vunpack.c.h.b16 %v524
  %v2051 = vunpack.c.l.b16 %v525
  %v2052 = vunpack.c.h.b16 %v525
  %v2053 = vunpack.c.l.b16 %v526
  %v2054 = vpack.c.b16 %v1165, %v1158
  %v2055 = vpack.c.b16 %v1166, %v1159
  %v2056 = vpack.c.b16 %v1167, %v1160
  %v2057 = vpack.c.b16 %v1168, %v1161
  %v2058 = vpack.c.b16 %v1169, %v1162
  %v2059 = vpack.c.b16 %v1170, %v1163
  %v2060 = vpack.c.b16 %v1171, %v1164
  %v2061 = vpack.c.b16 %v1179, %v1172
  %v2062 = vpack.c.b16 %v1180, %v1173
  %v2063 = vpack.c.b16 %v1181, %v1174
  %v2064 = vpack.c.b16 %v1182, %v1175
  %v2065 = vpack.c.b16 %v1183, %v1176
  %v2066 = vpack.c.b16 %v1184, %v1177
  %v2067 = vpack.c.b16 %v1185, %v1178
  %v2068 = vpack.c.b16 %v1193, %v1186
  %v2069 = vpack.c.b16 %v1194, %v1187
  %v2070 = vpack.c.b16 %v1195, %v1188
  %v2071 = vpack.c.b16 %v1196, %v1189
  %v2072 = vpack.c.b16 %v1197, %v1190
  %v2073 = vpack.c.b16 %v1198, %v1191
  %v2074 = vpack.c.b16 %v1199, %v1192
  %v2075 = vpack.c.b16 %v1207, %v1200
  %v2076 = vpack.c.b16 %v1208, %v1201
  %v2077 = vpack.c.b16 %v1209, %v1202
  %v2078 = vpack.c.b16 %v1210, %v1203
  %v2079 = vpack.c.b16 %v1211, %v1204
  %v2080 = vpack.c.b16 %v1212, %v1205
  %v2081 = vpack.c.b16 %v1213, %v1206
  %v2082 = vpack.c.b16 %v1221, %v1214
  %v2083 = vpack.c.b16 %v1222, %v1215
  %v2084 = vpack.c.b16 %v1223, %v1216
  %v2085 = vpack.c.b16 %v1224, %v1217
  %v2086 = vpack.c.b16 %v1225, %v1218
  %v2087 = vpack.c.b16 %v1226, %v1219
  %v2088 = vpack.c.b16 %v1227, %v1220
  %v2089 = vpack.c.b16 %v1235, %v1228
  %v2090 = vpack.c.b16 %v1236, %v1229
  %v2091 = vpack.c.b16 %v1237, %v1230
  %v2092 = vpack.c.b16 %v1238, %v1231
  %v2093 = vpack.c.b16 %v1239, %v1232
  %v2094 = vpack.c.b16 %v1240, %v1233
  %v2095 = vpack.c.b16 %v1241, %v1234
  %v2096 = vpack.c.b16 %v1249, %v1242
  %v2097 = vpack.c.b16 %v1250, %v1243
  %v2098 = vpack.c.b16 %v1251, %v1244
  %v2099 = vpack.c.b16 %v1252, %v1245
  %v2100 = vpack.c.b16 %v1253, %v1246
  %v2101 = vpack.c.b16 %v1254, %v1247
  %v2102 = vpack.c.b16 %v1255, %v1248
  %v2103 = vpack.c.b16 %v1263, %v1256
  %v2104 = vpack.c.b16 %v1264, %v1257
  %v2105 = vpack.c.b16 %v1265, %v1258
  %v2106 = vpack.c.b16 %v1266, %v1259
  %v2107 = vpack.c.b16 %v1267, %v1260
  %v2108 = vpack.c.b16 %v1268, %v1261
  %v2109 = vpack.c.b16 %v1269, %v1262
  %v2110 = vpack.c.b16 %v1277, %v1270
  %v2111 = vpack.c.b16 %v1278, %v1271
  %v2112 = vpack.c.b16 %v1279, %v1272
  %v2113 = vpack.c.b16 %v1280, %v1273
  %v2114 = vpack.c.b16 %v1281, %v1274
  %v2115 = vpack.c.b16 %v1282, %v1275
  %v2116 = vpack.c.b16 %v1283, %v1276
  %v2117 = vpack.c.b16 %v1291, %v1284
  %v2118 = vpack.c.b16 %v1292, %v1285
  %v2119 = vpack.c.b16 %v1293, %v1286
  %v2120 = vpack.c.b16 %v1294, %v1287
  %v2121 = vpack.c.b16 %v1295, %v1288
  %v2122 = vpack.c.b16 %v1296, %v1289
  %v2123 = vpack.c.b16 %v1297, %v1290
  %v2124 = vpack.c.b16 %v1305, %v1298
  %v2125 = vpack.c.b16 %v1306, %v1299
  %v2126 = vpack.c.b16 %v1307, %v1300
  %v2127 = vpack.c.b16 %v1308, %v1301
  %v2128 = vpack.c.b16 %v1309, %v1302
  %v2129 = vpack.c.b16 %v1310, %v1303
  %v2130 = vpack.c.b16 %v1311, %v1304
  %v2131 = vpack.c.b16 %v1319, %v1312
  %v2132 = vpack.c.b16 %v1320, %v1313
  %v2133 = vpack.c.b16 %v1321, %v1314
  %v2134 = vpack.c.b16 %v1322, %v1315
  %v2135 = vpack.c.b16 %v1323, %v1316
  %v2136 = vpack.c.b16 %v1324, %v1317
  %v2137 = vpack.c.b16 %v1325, %v1318
  %v2138 = vpack.c.b16 %v1333, %v1326
  %v2139 = vpack.c.b16 %v1334, %v1327
  %v2140 = vpack.c.b16 %v1335, %v1328
  %v2141 = vpack.c.b16 %v1336, %v1329
  %v2142 = vpack.c.b16 %v1337, %v1330
  %v2143 = vpack.c.b16 %v1338, %v1331
  %v2144 = vpack.c.b16 %v1339, %v1332
  %v2145 = vpack.c.b16 %v1347, %v1340
  %v2146 = vpack.c.b16 %v1348, %v1341
  %v2147 = vpack.c.b16 %v1349, %v1342
  %v2148 = vpack.c.b16 %v1350, %v1343
  %v2149 = vpack.c.b16 %v1351, %v1344
  %v2150 = vpack.c.b16 %v1352, %v1345
  %v2151 = vpack.c.b16 %v1353, %v1346
  %v2152 = vpack.c.b16 %v1361, %v1354
  %v2153 = vpack.c.b16 %v1362, %v1355
  %v2154 = vpack.c.b16 %v1363, %v1356
  %v2155 = vpack.c.b16 %v1364, %v1357
  %v2156 = vpack.c.b16 %v1365, %v1358
  %v2157 = vpack.c.b16 %v1366, %v1359
  %v2158 = vpack.c.b16 %v1367, %v1360
  %v2159 = vpack.c.b16 %v1375, %v1368
  %v2160 = vpack.c.b16 %v1376, %v1369
  %v2161 = vpack.c.b16 %v1377, %v1370
  %v2162 = vpack.c.b16 %v1378, %v1371
  %v2163 = vpack.c.b16 %v1379, %v1372
  %v2164 = vpack.c.b16 %v1380, %v1373
  %v2165 = vpack.c.b16 %v1381, %v1374
  %v2166 = vpack.c.b16 %v1389, %v1382
  %v2167 = vpack.c.b16 %v1390, %v1383
  %v2168 = vpack.c.b16 %v1391, %v1384
  %v2169 = vpack.c.b16 %v1392, %v1385
  %v2170 = vpack.c.b16 %v1393, %v1386
  %v2171 = vpack.c.b16 %v1394, %v1387
  %v2172 = vpack.c.b16 %v1395, %v1388
  %v2173 = vpack.c.b16 %v1403, %v1396
  %v2174 = vpack.c.b16 %v1404, %v1397
  %v2175 = vpack.c.b16 %v1405, %v1398
  %v2176 = vpack.c.b16 %v1406, %v1399
  %v2177 = vpack.c.b16 %v1407, %v1400
  %v2178 = vpack.c.b16 %v1408, %v1401
  %v2179 = vpack.c.b16 %v1409, %v1402
  %v2180 = vpack.c.b16 %v1417, %v1410
  %v2181 = vpack.c.b16 %v1418, %v1411
  %v2182 = vpack.c.b16 %v1419, %v1412
  %v2183 = vpack.c.b16 %v1420, %v1413
  %v2184 = vpack.c.b16 %v1421, %v1414
  %v2185 = vpack.c.b16 %v1422, %v1415
  %v2186 = vpack.c.b16 %v1423, %v1416
  %v2187 = vpack.c.b16 %v1431, %v1424
  %v2188 = vpack.c.b16 %v1432, %v1425
  %v2189 = vpack.c.b16 %v1433, %v1426
  %v2190 = vpack.c.b16 %v1434, %v1427
  %v2191 = vpack.c.b16 %v1435, %v1428
  %v2192 = vpack.c.b16 %v1436, %v1429
  %v2193 = vpack.c.b16 %v1437, %v1430
  %v2194 = vpack.c.b16 %v1445, %v1438
  %v2195 = vpack.c.b16 %v1446, %v1439
  %v2196 = vpack.c.b16 %v1447, %v1440
  %v2197 = vpack.c.b16 %v1448, %v1441
  %v2198 = vpack.c.b16 %v1449, %v1442
  %v2199 = vpack.c.b16 %v1450, %v1443
  %v2200 = vpack.c.b16 %v1451, %v1444
  %v2201 = vpack.c.b16 %v1459, %v1452
  %v2202 = vpack.c.b16 %v1460, %v1453
  %v2203 = vpack.c.b16 %v1461, %v1454
  %v2204 = vpack.c.b16 %v1462, %v1455
  %v2205 = vpack.c.b16 %v1463, %v1456
  %v2206 = vpack.c.b16 %v1464, %v1457
  %v2207 = vpack.c.b16 %v1465, %v1458
  %v2208 = vpack.c.b16 %v1473, %v1466
  %v2209 = vpack.c.b16 %v1474, %v1467
  %v2210 = vpack.c.b16 %v1475, %v1468
  %v2211 = vpack.c.b16 %v1476, %v1469
  %v2212 = vpack.c.b16 %v1477, %v1470
  %v2213 = vpack.c.b16 %v1478, %v1471
  %v2214 = vpack.c.b16 %v1479, %v1472
  %v2215 = vpack.c.b16 %v1487, %v1480
  %v2216 = vpack.c.b16 %v1488, %v1481
  %v2217 = vpack.c.b16 %v1489, %v1482
  %v2218 = vpack.c.b16 %v1490, %v1483
  %v2219 = vpack.c.b16 %v1491, %v1484
  %v2220 = vpack.c.b16 %v1492, %v1485
  %v2221 = vpack.c.b16 %v1493, %v1486
  %v2222 = vpack.c.b16 %v1501, %v1494
  %v2223 = vpack.c.b16 %v1502, %v1495
  %v2224 = vpack.c.b16 %v1503, %v1496
  %v2225 = vpack.c.b16 %v1504, %v1497
  %v2226 = vpack.c.b16 %v1505, %v1498
  %v2227 = vpack.c.b16 %v1506, %v1499
  %v2228 = vpack.c.b16 %v1507, %v1500
  %v2229 = vpack.c.b16 %v1515, %v1508
  %v2230 = vpack.c.b16 %v1516, %v1509
  %v2231 = vpack.c.b16 %v1517, %v1510
  %v2232 = vpack.c.b16 %v1518, %v1511
  %v2233 = vpack.c.b16 %v1519, %v1512
  %v2234 = vpack.c.b16 %v1520, %v1513
  %v2235 = vpack.c.b16 %v1521, %v1514
  %v2236 = vpack.c.b16 %v1529, %v1522
  %v2237 = vpack.c.b16 %v1530, %v1523
  %v2238 = vpack.c.b16 %v1531, %v1524
  %v2239 = vpack.c.b16 %v1532, %v1525
  %v2240 = vpack.c.b16 %v1533, %v1526
  %v2241 = vpack.c.b16 %v1534, %v1527
  %v2242 = vpack.c.b16 %v1535, %v1528
  %v2243 = vpack.c.b16 %v1543, %v1536
  %v2244 = vpack.c.b16 %v1544, %v1537
  %v2245 = vpack.c.b16 %v1545, %v1538
  %v2246 = vpack.c.b16 %v1546, %v1539
  %v2247 = vpack.c.b16 %v1547, %v1540
  %v2248 = vpack.c.b16 %v1548, %v1541
  %v2249 = vpack.c.b16 %v1549, %v1542
  %v2250 = vpack.c.b16 %v1557, %v1550
  %v2251 = vpack.c.b16 %v1558, %v1551
  %v2252 = vpack.c.b16 %v1559, %v1552
  %v2253 = vpack.c.b16 %v1560, %v1553
  %v2254 = vpack.c.b16 %v1561, %v1554
  %v2255 = vpack.c.b16 %v1562, %v1555
  %v2256 = vpack.c.b16 %v1563, %v1556
  %v2257 = vpack.c.b16 %v1571, %v1564
  %v2258 = vpack.c.b16 %v1572, %v1565
  %v2259 = vpack.c.b16 %v1573, %v1566
  %v2260 = vpack.c.b16 %v1574, %v1567
  %v2261 = vpack.c.b16 %v1575, %v1568
  %v2262 = vpack.c.b16 %v1576, %v1569
  %v2263 = vpack.c.b16 %v1577, %v1570
  %v2264 = vpack.c.b16 %v1585, %v1578
  %v2265 = vpack.c.b16 %v1586, %v1579
  %v2266 = vpack.c.b16 %v1587, %v1580
  %v2267 = vpack.c.b16 %v1588, %v1581
  %v2268 = vpack.c.b16 %v1589, %v1582
  %v2269 = vpack.c.b16 %v1590, %v1583
  %v2270 = vpack.c.b16 %v1591, %v1584
  %v2271 = vpack.c.b16 %v1599, %v1592
  %v2272 = vpack.c.b16 %v1600, %v1593
  %v2273 = vpack.c.b16 %v1601, %v1594
  %v2274 = vpack.c.b16 %v1602, %v1595
  %v2275 = vpack.c.b16 %v1603, %v1596
  %v2276 = vpack.c.b16 %v1604, %v1597
  %v2277 = vpack.c.b16 %v1605, %v1598
  %v2278 = vpack.c.b16 %v1613, %v1606
  %v2279 = vpack.c.b16 %v1614, %v1607
  %v2280 = vpack.c.b16 %v1615, %v1608
  %v2281 = vpack.c.b16 %v1616, %v1609
  %v2282 = vpack.c.b16 %v1617, %v1610
  %v2283 = vpack.c.b16 %v1618, %v1611
  %v2284 = vpack.c.b16 %v1619, %v1612
  %v2285 = vpack.c.b16 %v1627, %v1620
  %v2286 = vpack.c.b16 %v1628, %v1621
  %v2287 = vpack.c.b16 %v1629, %v1622
  %v2288 = vpack.c.b16 %v1630, %v1623
  %v2289 = vpack.c.b16 %v1631, %v1624
  %v2290 = vpack.c.b16 %v1632, %v1625
  %v2291 = vpack.c.b16 %v1633, %v1626
  %v2292 = vpack.c.b16 %v1641, %v1634
  %v2293 = vpack.c.b16 %v1642, %v1635
  %v2294 = vpack.c.b16 %v1643, %v1636
  %v2295 = vpack.c.b16 %v1644, %v1637
  %v2296 = vpack.c.b16 %v1645, %v1638
  %v2297 = vpack.c.b16 %v1646, %v1639
  %v2298 = vpack.c.b16 %v1647, %v1640
  %v2299 = vpack.c.b16 %v1655, %v1648
  %v2300 = vpack.c.b16 %v1656, %v1649
  %v2301 = vpack.c.b16 %v1657, %v1650
  %v2302 = vpack.c.b16 %v1658, %v1651
  %v2303 = vpack.c.b16 %v1659, %v1652
  %v2304 = vpack.c.b16 %v1660, %v1653
  %v2305 = vpack.c.b16 %v1661, %v1654
  %v2306 = vpack.c.b16 %v1669, %v1662
  %v2307 = vpack.c.b16 %v1670, %v1663
  %v2308 = vpack.c.b16 %v1671, %v1664
  %v2309 = vpack.c.b16 %v1672, %v1665
  %v2310 = vpack.c.b16 %v1673, %v1666
  %v2311 = vpack.c.b16 %v1674, %v1667
  %v2312 = vpack.c.b16 %v1675, %v1668
  %v2313 = vpack.c.b16 %v1683, %v1676
  %v2314 = vpack.c.b16 %v1684, %v1677
  %v2315 = vpack.c.b16 %v1685, %v1678
  %v2316 = vpack.c.b16 %v1686, %v1679
  %v2317 = vpack.c.b16 %v1687, %v1680
  %v2318 = vpack.c.b16 %v1688, %v1681
  %v2319 = vpack.c.b16 %v1689, %v1682
  %v2320 = vpack.c.b16 %v1697, %v1690
  %v2321 = vpack.c.b16 %v1698, %v1691
  %v2322 = vpack.c.b16 %v1699, %v1692
  %v2323 = vpack.c.b16 %v1700, %v1693
  %v2324 = vpack.c.b16 %v1701, %v1694
  %v2325 = vpack.c.b16 %v1702, %v1695
  %v2326 = vpack.c.b16 %v1703, %v1696
  %v2327 = vpack.c.b16 %v1711, %v1704
  %v2328 = vpack.c.b16 %v1712, %v1705
  %v2329 = vpack.c.b16 %v1713, %v1706
  %v2330 = vpack.c.b16 %v1714, %v1707
  %v2331 = vpack.c.b16 %v1715, %v1708
  %v2332 = vpack.c.b16 %v1716, %v1709
  %v2333 = vpack.c.b16 %v1717, %v1710
  %v2334 = vpack.c.b16 %v1725, %v1718
  %v2335 = vpack.c.b16 %v1726, %v1719
  %v2336 = vpack.c.b16 %v1727, %v1720
  %v2337 = vpack.c.b16 %v1728, %v1721
  %v2338 = vpack.c.b16 %v1729, %v1722
  %v2339 = vpack.c.b16 %v1730, %v1723
  %v2340 = vpack.c.b16 %v1731, %v1724
  %v2341 = vpack.c.b16 %v1739, %v1732
  %v2342 = vpack.c.b16 %v1740, %v1733
  %v2343 = vpack.c.b16 %v1741, %v1734
  %v2344 = vpack.c.b16 %v1742, %v1735
  %v2345 = vpack.c.b16 %v1743, %v1736
  %v2346 = vpack.c.b16 %v1744, %v1737
  %v2347 = vpack.c.b16 %v1745, %v1738
  %v2348 = vpack.c.b16 %v1753, %v1746
  %v2349 = vpack.c.b16 %v1754, %v1747
  %v2350 = vpack.c.b16 %v1755, %v1748
  %v2351 = vpack.c.b16 %v1756, %v1749
  %v2352 = vpack.c.b16 %v1757, %v1750
  %v2353 = vpack.c.b16 %v1758, %v1751
  %v2354 = vpack.c.b16 %v1759, %v1752
  %v2355 = vpack.c.b16 %v1767, %v1760
  %v2356 = vpack.c.b16 %v1768, %v1761
  %v2357 = vpack.c.b16 %v1769, %v1762
  %v2358 = vpack.c.b16 %v1770, %v1763
  %v2359 = vpack.c.b16 %v1771, %v1764
  %v2360 = vpack.c.b16 %v1772, %v1765
  %v2361 = vpack.c.b16 %v1773, %v1766
  %v2362 = vpack.c.b16 %v1781, %v1774
  %v2363 = vpack.c.b16 %v1782, %v1775
  %v2364 = vpack.c.b16 %v1783, %v1776
  %v2365 = vpack.c.b16 %v1784, %v1777
  %v2366 = vpack.c.b16 %v1785, %v1778
  %v2367 = vpack.c.b16 %v1786, %v1779
  %v2368 = vpack.c.b16 %v1787, %v1780
  %v2369 = vpack.c.b16 %v1795, %v1788
  %v2370 = vpack.c.b16 %v1796, %v1789
  %v2371 = vpack.c.b16 %v1797, %v1790
  %v2372 = vpack.c.b16 %v1798, %v1791
  %v2373 = vpack.c.b16 %v1799, %v1792
  %v2374 = vpack.c.b16 %v1800, %v1793
  %v2375 = vpack.c.b16 %v1801, %v1794
  %v2376 = vpack.c.b16 %v1809, %v1802
  %v2377 = vpack.c.b16 %v1810, %v1803
  %v2378 = vpack.c.b16 %v1811, %v1804
  %v2379 = vpack.c.b16 %v1812, %v1805
  %v2380 = vpack.c.b16 %v1813, %v1806
  %v2381 = vpack.c.b16 %v1814, %v1807
  %v2382 = vpack.c.b16 %v1815, %v1808
  %v2383 = vpack.c.b16 %v1823, %v1816
  %v2384 = vpack.c.b16 %v1824, %v1817
  %v2385 = vpack.c.b16 %v1825, %v1818
  %v2386 = vpack.c.b16 %v1826, %v1819
  %v2387 = vpack.c.b16 %v1827, %v1820
  %v2388 = vpack.c.b16 %v1828, %v1821
  %v2389 = vpack.c.b16 %v1829, %v1822
  %v2390 = vpack.c.b16 %v1837, %v1830
  %v2391 = vpack.c.b16 %v1838, %v1831
  %v2392 = vpack.c.b16 %v1839, %v1832
  %v2393 = vpack.c.b16 %v1840, %v1833
  %v2394 = vpack.c.b16 %v1841, %v1834
  %v2395 = vpack.c.b16 %v1842, %v1835
  %v2396 = vpack.c.b16 %v1843, %v1836
  %v2397 = vpack.c.b16 %v1851, %v1844
  %v2398 = vpack.c.b16 %v1852, %v1845
  %v2399 = vpack.c.b16 %v1853, %v1846
  %v2400 = vpack.c.b16 %v1854, %v1847
  %v2401 = vpack.c.b16 %v1855, %v1848
  %v2402 = vpack.c.b16 %v1856, %v1849
  %v2403 = vpack.c.b16 %v1857, %v1850
  %v2404 = vpack.c.b16 %v1865, %v1858
  %v2405 = vpack.c.b16 %v1866, %v1859
  %v2406 = vpack.c.b16 %v1867, %v1860
  %v2407 = vpack.c.b16 %v1868, %v1861
  %v2408 = vpack.c.b16 %v1869, %v1862
  %v2409 = vpack.c.b16 %v1870, %v1863
  %v2410 = vpack.c.b16 %v1871, %v1864
  %v2411 = vpack.c.b16 %v1879, %v1872
  %v2412 = vpack.c.b16 %v1880, %v1873
  %v2413 = vpack.c.b16 %v1881, %v1874
  %v2414 = vpack.c.b16 %v1882, %v1875
  %v2415 = vpack.c.b16 %v1883, %v1876
  %v2416 = vpack.c.b16 %v1884, %v1877
  %v2417 = vpack.c.b16 %v1885, %v1878
  %v2418 = vpack.c.b16 %v1893, %v1886
  %v2419 = vpack.c.b16 %v1894, %v1887
  %v2420 = vpack.c.b16 %v1895, %v1888
  %v2421 = vpack.c.b16 %v1896, %v1889
  %v2422 = vpack.c.b16 %v1897, %v1890
  %v2423 = vpack.c.b16 %v1898, %v1891
  %v2424 = vpack.c.b16 %v1899, %v1892
  %v2425 = vpack.c.b16 %v1907, %v1900
  %v2426 = vpack.c.b16 %v1908, %v1901
  %v2427 = vpack.c.b16 %v1909, %v1902
  %v2428 = vpack.c.b16 %v1910, %v1903
  %v2429 = vpack.c.b16 %v1911, %v1904
  %v2430 = vpack.c.b16 %v1912, %v1905
  %v2431 = vpack.c.b16 %v1913, %v1906
  %v2432 = vpack.c.b16 %v1921, %v1914
  %v2433 = vpack.c.b16 %v1922, %v1915
  %v2434 = vpack.c.b16 %v1923, %v1916
  %v2435 = vpack.c.b16 %v1924, %v1917
  %v2436 = vpack.c.b16 %v1925, %v1918
  %v2437 = vpack.c.b16 %v1926, %v1919
  %v2438 = vpack.c.b16 %v1927, %v1920
  %v2439 = vpack.c.b16 %v1935, %v1928
  %v2440 = vpack.c.b16 %v1936, %v1929
  %v2441 = vpack.c.b16 %v1937, %v1930
  %v2442 = vpack.c.b16 %v1938, %v1931
  %v2443 = vpack.c.b16 %v1939, %v1932
  %v2444 = vpack.c.b16 %v1940, %v1933
  %v2445 = vpack.c.b16 %v1941, %v1934
  %v2446 = vpack.c.b16 %v1949, %v1942
  %v2447 = vpack.c.b16 %v1950, %v1943
  %v2448 = vpack.c.b16 %v1951, %v1944
  %v2449 = vpack.c.b16 %v1952, %v1945
  %v2450 = vpack.c.b16 %v1953, %v1946
  %v2451 = vpack.c.b16 %v1954, %v1947
  %v2452 = vpack.c.b16 %v1955, %v1948
  %v2453 = vpack.c.b16 %v1963, %v1956
  %v2454 = vpack.c.b16 %v1964, %v1957
  %v2455 = vpack.c.b16 %v1965, %v1958
  %v2456 = vpack.c.b16 %v1966, %v1959
  %v2457 = vpack.c.b16 %v1967, %v1960
  %v2458 = vpack.c.b16 %v1968, %v1961
  %v2459 = vpack.c.b16 %v1969, %v1962
  %v2460 = vpack.c.b16 %v1977, %v1970
  %v2461 = vpack.c.b16 %v1978, %v1971
  %v2462 = vpack.c.b16 %v1979, %v1972
  %v2463 = vpack.c.b16 %v1980, %v1973
  %v2464 = vpack.c.b16 %v1981, %v1974
  %v2465 = vpack.c.b16 %v1982, %v1975
  %v2466 = vpack.c.b16 %v1983, %v1976
  %v2467 = vpack.c.b16 %v1991, %v1984
  %v2468 = vpack.c.b16 %v1992, %v1985
  %v2469 = vpack.c.b16 %v1993, %v1986
  %v2470 = vpack.c.b16 %v1994, %v1987
  %v2471 = vpack.c.b16 %v1995, %v1988
  %v2472 = vpack.c.b16 %v1996, %v1989
  %v2473 = vpack.c.b16 %v1997, %v1990
  %v2474 = vpack.c.b16 %v2005, %v1998
  %v2475 = vpack.c.b16 %v2006, %v1999
  %v2476 = vpack.c.b16 %v2007, %v2000
  %v2477 = vpack.c.b16 %v2008, %v2001
  %v2478 = vpack.c.b16 %v2009, %v2002
  %v2479 = vpack.c.b16 %v2010, %v2003
  %v2480 = vpack.c.b16 %v2011, %v2004
  %v2481 = vpack.c.b16 %v2019, %v2012
  %v2482 = vpack.c.b16 %v2020, %v2013
  %v2483 = vpack.c.b16 %v2021, %v2014
  %v2484 = vpack.c.b16 %v2022, %v2015
  %v2485 = vpack.c.b16 %v2023, %v2016
  %v2486 = vpack.c.b16 %v2024, %v2017
  %v2487 = vpack.c.b16 %v2025, %v2018
  %v2488 = vpack.c.b16 %v2033, %v2026
  %v2489 = vpack.c.b16 %v2034, %v2027
  %v2490 = vpack.c.b16 %v2035, %v2028
  %v2491 = vpack.c.b16 %v2036, %v2029
  %v2492 = vpack.c.b16 %v2037, %v2030
  %v2493 = vpack.c.b16 %v2038, %v2031
  %v2494 = vpack.c.b16 %v2039, %v2032
  %v2495 = vpack.c.b16 %v2047, %v2040
  %v2496 = vpack.c.b16 %v2048, %v2041
  %v2497 = vpack.c.b16 %v2049, %v2042
  %v2498 = vpack.c.b16 %v2050, %v2043
  %v2499 = vpack.c.b16 %v2051, %v2044
  %v2500 = vpack.c.b16 %v2052, %v2045
  %v2501 = vpack.c.b16 %v2053, %v2046
  %v3062 = vunpack.c.l.b16 %v527
  %v3063 = vunpack.c.l.b16 %v528
  %v3064 = vunpack.c.l.b16 %v529
  %v3065 = vunpack.c.l.b16 %v530
  %v3066 = vunpack.c.l.b16 %v531
  %v3067 = vunpack.c.l.b16 %v532
  %v3068 = vunpack.c.l.b16 %v533
  %v3069 = vunpack.c.l.b16 %v534
  %v3070 = vunpack.c.l.b16 %v535
  %v3071 = vunpack.c.l.b16 %v536
  %v3072 = vunpack.c.l.b16 %v537
  %v3073 = vunpack.c.l.b16 %v538
  %v3074 = vunpack.c.l.b16 %v539
  %v3075 = vunpack.c.l.b16 %v540
  %v3076 = vunpack.c.l.b16 %v541
  %v3077 = vunpack.c.l.b16 %v542
  %v3078 = vunpack.c.l.b16 %v543
  %v3079 = vunpack.c.l.b16 %v544
  %v3080 = vunpack.c.l.b16 %v545
  %v3081 = vunpack.c.l.b16 %v546
  %v3082 = vunpack.c.l.b16 %v547
  %v3083 = vunpack.c.l.b16 %v548
  %v3084 = vunpack.c.l.b16 %v549
  %v3085 = vunpack.c.l.b16 %v550
  %v3086 = vunpack.c.l.b16 %v551
  %v3087 = vunpack.c.l.b16 %v552
  %v3088 = vunpack.c.l.b16 %v553
  %v3089 = vunpack.c.l.b16 %v554
  %v3090 = vunpack.c.l.b16 %v555
  %v3091 = vunpack.c.l.b16 %v556
  %v3092 = vunpack.c.l.b16 %v557
  %v3093 = vunpack.c.l.b16 %v558
  %v3094 = vunpack.c.l.b16 %v559
  %v3095 = vunpack.c.l.b16 %v560
  %v3096 = vunpack.c.l.b16 %v561
  %v3097 = vunpack.c.l.b16 %v562
  %v3098 = vunpack.c.l.b16 %v563
  %v3099 = vunpack.c.l.b16 %v564
  %v3100 = vunpack.c.l.b16 %v565
  %v3101 = vunpack.c.l.b16 %v566
  %v3102 = vunpack.c.l.b16 %v567
  %v3103 = vunpack.c.l.b16 %v568
  %v3104 = vunpack.c.l.b16 %v569
  %v3105 = vunpack.c.l.b16 %v570
  %v3106 = vunpack.c.l.b16 %v571
  %v3107 = vunpack.c.l.b16 %v572
  %v3108 = vunpack.c.l.b16 %v573
  %v3109 = vunpack.c.l.b16 %v574
  %v3110 = vunpack.c.l.b16 %v575
  %v3111 = vunpack.c.l.b16 %v576
  %v3112 = vunpack.c.l.b16 %v577
  %v3113 = vunpack.c.l.b16 %v578
  %v3114 = vunpack.c.l.b16 %v579
  %v3115 = vunpack.c.l.b16 %v580
  %v3116 = vunpack.c.l.b16 %v581
  %v3117 = vunpack.c.l.b16 %v582
  %v3118 = vunpack.c.l.b16 %v583
  %v3119 = vunpack.c.l.b16 %v584
  %v3120 = vunpack.c.l.b16 %v585
  %v3121 = vunpack.c.l.b16 %v586
  %v3122 = vunpack.c.l.b16 %v587
  %v3123 = vunpack.c.l.b16 %v588
  %v3124 = vunpack.c.l.b16 %v589
  %v3125 = vunpack.c.l.b16 %v590
  %v3126 = vunpack.c.l.b16 %v591
  %v3127 = vunpack.c.l.b16 %v592
  %v3128 = vunpack.c.l.b16 %v593
  %v3129 = vunpack.c.l.b16 %v594
  %v3130 = vunpack.c.l.b16 %v595
  %v3131 = vunpack.c.l.b16 %v596
  %v3132 = vunpack.c.l.b16 %v597
  %v3133 = vunpack.c.l.b16 %v598
  %v3134 = vunpack.c.l.b16 %v599
  %v3135 = vunpack.c.l.b16 %v600
  %v3136 = vunpack.c.l.b16 %v601
  %v3137 = vunpack.c.l.b16 %v602
  %v3138 = vunpack.c.l.b16 %v603
  %v3139 = vunpack.c.l.b16 %v604
  %v3140 = vunpack.c.l.b16 %v605
  %v3141 = vunpack.c.l.b16 %v606
  %v3142 = vunpack.c.l.b16 %v607
  %v3143 = vunpack.c.l.b16 %v608
  %v3144 = vunpack.c.l.b16 %v609
  %v3145 = vunpack.c.l.b16 %v610
  %v3146 = vunpack.c.l.b16 %v611
  %v3147 = vunpack.c.l.b16 %v612
  %v3148 = vunpack.c.l.b16 %v613
  %v3149 = vunpack.c.l.b16 %v614
  %v3150 = vunpack.c.l.b16 %v615
  %v3151 = vunpack.c.l.b16 %v616
  %v3152 = vunpack.c.l.b16 %v617
  %v3153 = vunpack.c.l.b16 %v618
  %v3154 = vunpack.c.l.b16 %v619
  %v3155 = vunpack.c.l.b16 %v620
  %v3156 = vunpack.c.l.b16 %v621
  %v3157 = vunpack.c.l.b16 %v622
  %v3158 = vunpack.c.l.b16 %v623
  %v3159 = vunpack.c.l.b16 %v624
  %v3160 = vunpack.c.l.b16 %v625
  %v3161 = vunpack.c.l.b16 %v626
  %v3162 = vunpack.c.l.b16 %v627
  %v3163 = vunpack.c.l.b16 %v628
  %v3164 = vunpack.c.l.b16 %v629
  %v3165 = vunpack.c.l.b16 %v630
  %v3166 = vunpack.c.l.b16 %v631
  %v3167 = vunpack.c.l.b16 %v632
  %v3168 = vunpack.c.l.b16 %v633
  %v3169 = vunpack.c.l.b16 %v634
  %v3170 = vunpack.c.l.b16 %v635
  %v3171 = vunpack.c.l.b16 %v636
  %v3172 = vunpack.c.l.b16 %v637
  %v3173 = vunpack.c.l.b16 %v638
  %v3174 = vpack.c.b16 %v3063, %v3062
  %v3175 = vpack.c.b16 %v3065, %v3064
  %v3176 = vpack.c.b16 %v3067, %v3066
  %v3177 = vpack.c.b16 %v3069, %v3068
  %v3178 = vpack.c.b16 %v3071, %v3070
  %v3179 = vpack.c.b16 %v3073, %v3072
  %v3180 = vpack.c.b16 %v3075, %v3074
  %v3181 = vpack.c.b16 %v3077, %v3076
  %v3182 = vpack.c.b16 %v3079, %v3078
  %v3183 = vpack.c.b16 %v3081, %v3080
  %v3184 = vpack.c.b16 %v3083, %v3082
  %v3185 = vpack.c.b16 %v3085, %v3084
  %v3186 = vpack.c.b16 %v3087, %v3086
  %v3187 = vpack.c.b16 %v3089, %v3088
  %v3188 = vpack.c.b16 %v3091, %v3090
  %v3189 = vpack.c.b16 %v3093, %v3092
  %v3190 = vpack.c.b16 %v3095, %v3094
  %v3191 = vpack.c.b16 %v3097, %v3096
  %v3192 = vpack.c.b16 %v3099, %v3098
  %v3193 = vpack.c.b16 %v3101, %v3100
  %v3194 = vpack.c.b16 %v3103, %v3102
  %v3195 = vpack.c.b16 %v3105, %v3104
  %v3196 = vpack.c.b16 %v3107, %v3106
  %v3197 = vpack.c.b16 %v3109, %v3108
  %v3198 = vpack.c.b16 %v3111, %v3110
  %v3199 = vpack.c.b16 %v3113, %v3112
  %v3200 = vpack.c.b16 %v3115, %v3114
  %v3201 = vpack.c.b16 %v3117, %v3116
  %v3202 = vpack.c.b16 %v3119, %v3118
  %v3203 = vpack.c.b16 %v3121, %v3120
  %v3204 = vpack.c.b16 %v3123, %v3122
  %v3205 = vpack.c.b16 %v3125, %v3124
  %v3206 = vpack.c.b16 %v3127, %v3126
  %v3207 = vpack.c.b16 %v3129, %v3128
  %v3208 = vpack.c.b16 %v3131, %v3130
  %v3209 = vpack.c.b16 %v3133, %v3132
  %v3210 = vpack.c.b16 %v3135, %v3134
  %v3211 = vpack.c.b16 %v3137, %v3136
  %v3212 = vpack.c.b16 %v3139, %v3138
  %v3213 = vpack.c.b16 %v3141, %v3140
  %v3214 = vpack.c.b16 %v3143, %v3142
  %v3215 = vpack.c.b16 %v3145, %v3144
  %v3216 = vpack.c.b16 %v3147, %v3146
  %v3217 = vpack.c.b16 %v3149, %v3148
  %v3218 = vpack.c.b16 %v3151, %v3150
  %v3219 = vpack.c.b16 %v3153, %v3152
  %v3220 = vpack.c.b16 %v3155, %v3154
  %v3221 = vpack.c.b16 %v3157, %v3156
  %v3222 = vpack.c.b16 %v3159, %v3158
  %v3223 = vpack.c.b16 %v3161, %v3160
  %v3224 = vpack.c.b16 %v3163, %v3162
  %v3225 = vpack.c.b16 %v3165, %v3164
  %v3226 = vpack.c.b16 %v3167, %v3166
  %v3227 = vpack.c.b16 %v3169, %v3168
  %v3228 = vpack.c.b16 %v3171, %v3170
  %v3229 = vpack.c.b16 %v3173, %v3172
  %3286 = vmatprep.subr.bf16.mxu0 0
  %3287 = vmatpush1.bf16.msra.mxu0 %v3174
  %3288 = vmatprep.subr.bf16.mxu0 0
  %3289 = vmatpush1.bf16.msra.mxu0 %v3175
  %3290 = vmatprep.subr.bf16.mxu0 0
  %3291 = vmatpush1.bf16.msra.mxu0 %v3176
  %3292 = vmatprep.subr.bf16.mxu0 0
  %3293 = vmatpush1.bf16.msra.mxu0 %v3177
  %3294 = vmatprep.subr.bf16.mxu0 0
  %3295 = vmatpush1.bf16.msra.mxu0 %v3178
  %3296 = vmatprep.subr.bf16.mxu0 0
  %3297 = vmatpush1.bf16.msra.mxu0 %v3179
  %3298 = vmatprep.subr.bf16.mxu0 0
  %3299 = vmatpush1.bf16.msra.mxu0 %v3180
  %3300 = vmatprep.subr.bf16.mxu0 0
  %3301 = vmatpush1.bf16.msra.mxu0 %v3181
  %3302 = vmatprep.subr.bf16.mxu0 0
  %3303 = vmatpush1.bf16.msra.mxu0 %v3182
  %3304 = vmatprep.subr.bf16.mxu0 0
  %3305 = vmatpush1.bf16.msra.mxu0 %v3183
  %3306 = vmatprep.subr.bf16.mxu0 0
  %3307 = vmatpush1.bf16.msra.mxu0 %v3184
  %3308 = vmatprep.subr.bf16.mxu0 0
  %3309 = vmatpush1.bf16.msra.mxu0 %v3185
  %3310 = vmatprep.subr.bf16.mxu0 0
  %3311 = vmatpush1.bf16.msra.mxu0 %v3186
  %3312 = vmatprep.subr.bf16.mxu0 0
  %3313 = vmatpush1.bf16.msra.mxu0 %v3187
  %3314 = vmatprep.subr.bf16.mxu0 0
  %3315 = vmatpush1.bf16.msra.mxu0 %v3188
  %3316 = vmatprep.subr.bf16.mxu0 0
  %3317 = vmatpush1.bf16.msra.mxu0 %v3189
  %3318 = vmatprep.mubr.bf16.mxu0 %v2055
  %3319 = vmatmul.mubr.bf16.gmra.mrb[0].mxu0 %v2054
  %v3320 = vpop.f32.mrb[0].mxu0
  %v3321 = vadd.f32 %v644, %v3320
  %v3322 = vpop.f32.mrb[0].mxu0
  %v3323 = vpop.f32.mrb[0].mxu0
  %v3324 = vadd.f32 %v644, %v3323
  %v3325 = vpop.f32.mrb[0].mxu0
  %3326 = vmatprep.mubr.bf16.mxu0 %v2062
  %3327 = vmatmul.mubr.bf16.gmra.mrb[0].mxu0 %v2061
  %v3328 = vpop.f32.mrb[0].mxu0
  %v3329 = vadd.f32 %v644, %v3328
  %v3330 = vpop.f32.mrb[0].mxu0
  %v3331 = vpop.f32.mrb[0].mxu0
  %v3332 = vadd.f32 %v644, %v3331
  %v3333 = vpop.f32.mrb[0].mxu0
  %3334 = vmatprep.mubr.bf16.mxu0 %v2069
  %3335 = vmatmul.mubr.bf16.gmra.mrb[0].mxu0 %v2068
  %v3336 = vpop.f32.mrb[0].mxu0
  %v3337 = vadd.f32 %v644, %v3336
  %v3338 = vpop.f32.mrb[0].mxu0
  %v3339 = vpop.f32.mrb[0].mxu0
  %v3340 = vadd.f32 %v644, %v3339
  %v3341 = vpop.f32.mrb[0].mxu0
  %3342 = vmatprep.mubr.bf16.mxu0 %v2076
  %3343 = vmatmul.mubr.bf16.gmra.mrb[0].mxu0 %v2075
  %v3344 = vpop.f32.mrb[0].mxu0
  %v3345 = vadd.f32 %v644, %v3344
  %v3346 = vpop.f32.mrb[0].mxu0
  %v3347 = vpop.f32.mrb[0].mxu0
  %v3348 = vadd.f32 %v644, %v3347
  %v3349 = vpop.f32.mrb[0].mxu0
  %3350 = vmatprep.mubr.bf16.mxu0 %v2083
  %3351 = vmatmul.mubr.bf16.gmra.mrb[0].mxu0 %v2082
  %v3352 = vpop.f32.mrb[0].mxu0
  %v3353 = vadd.f32 %v644, %v3352
  %v3354 = vpop.f32.mrb[0].mxu0
  %v3355 = vpop.f32.mrb[0].mxu0
  %v3356 = vadd.f32 %v644, %v3355
  %v3357 = vpop.f32.mrb[0].mxu0
  %3358 = vmatprep.mubr.bf16.mxu0 %v2090
  %3359 = vmatmul.mubr.bf16.gmra.mrb[0].mxu0 %v2089
  %v3360 = vpop.f32.mrb[0].mxu0
  %v3361 = vadd.f32 %v644, %v3360
  %v3362 = vpop.f32.mrb[0].mxu0
  %v3363 = vpop.f32.mrb[0].mxu0
  %v3364 = vadd.f32 %v644, %v3363
  %v3365 = vpop.f32.mrb[0].mxu0
  %3366 = vmatprep.mubr.bf16.mxu0 %v2097
  %3367 = vmatmul.mubr.bf16.gmra.mrb[0].mxu0 %v2096
  %v3368 = vpop.f32.mrb[0].mxu0
  %v3369 = vadd.f32 %v644, %v3368
  %v3370 = vpop.f32.mrb[0].mxu0
  %v3371 = vpop.f32.mrb[0].mxu0
  %v3372 = vadd.f32 %v644, %v3371
  %v3373 = vpop.f32.mrb[0].mxu0
  %3374 = vmatprep.mubr.bf16.mxu0 %v2104
  %3375 = vmatmul.mubr.bf16.gmra.mrb[0].mxu0 %v2103
  %v3376 = vpop.f32.mrb[0].mxu0
  %v3377 = vadd.f32 %v644, %v3376
  %v3378 = vpop.f32.mrb[0].mxu0
  %v3379 = vpop.f32.mrb[0].mxu0
  %v3380 = vadd.f32 %v644, %v3379
  %v3381 = vpop.f32.mrb[0].mxu0
  %3382 = vmatprep.mubr.bf16.mxu0 %v2111
  %3383 = vmatmul.mubr.bf16.gmra.mrb[0].mxu0 %v2110
  %v3384 = vpop.f32.mrb[0].mxu0
  %v3385 = vadd.f32 %v644, %v3384
  %v3386 = vpop.f32.mrb[0].mxu0
  %v3387 = vpop.f32.mrb[0].mxu0
  %v3388 = vadd.f32 %v644, %v3387
  %v3389 = vpop.f32.mrb[0].mxu0
  %3390 = vmatprep.mubr.bf16.mxu0 %v2118
  %3391 = vmatmul.mubr.bf16.gmra.mrb[0].mxu0 %v2117
  %v3392 = vpop.f32.mrb[0].mxu0
  %v3393 = vadd.f32 %v644, %v3392
  %v3394 = vpop.f32.mrb[0].mxu0
  %v3395 = vpop.f32.mrb[0].mxu0
  %v3396 = vadd.f32 %v644, %v3395
  %v3397 = vpop.f32.mrb[0].mxu0
  %3398 = vmatprep.mubr.bf16.mxu0 %v2125
  %3399 = vmatmul.mubr.bf16.gmra.mrb[0].mxu0 %v2124
  %v3400 = vpop.f32.mrb[0].mxu0
  %v3401 = vadd.f32 %v644, %v3400
  %v3402 = vpop.f32.mrb[0].mxu0
  %v3403 = vpop.f32.mrb[0].mxu0
  %v3404 = vadd.f32 %v644, %v3403
  %v3405 = vpop.f32.mrb[0].mxu0
  %3406 = vmatprep.mubr.bf16.mxu0 %v2132
  %3407 = vmatmul.mubr.bf16.gmra.mrb[0].mxu0 %v2131
  %v3408 = vpop.f32.mrb[0].mxu0
  %v3409 = vadd.f32 %v644, %v3408
  %v3410 = vpop.f32.mrb[0].mxu0
  %v3411 = vpop.f32.mrb[0].mxu0
  %v3412 = vadd.f32 %v644, %v3411
  %v3413 = vpop.f32.mrb[0].mxu0
  %3414 = vmatprep.mubr.bf16.mxu0 %v2139
  %3415 = vmatmul.mubr.bf16.gmra.mrb[0].mxu0 %v2138
  %v3416 = vpop.f32.mrb[0].mxu0
  %v3417 = vadd.f32 %v644, %v3416
  %v3418 = vpop.f32.mrb[0].mxu0
  %v3419 = vpop.f32.mrb[0].mxu0
  %v3420 = vadd.f32 %v644, %v3419
  %v3421 = vpop.f32.mrb[0].mxu0
  %3422 = vmatprep.mubr.bf16.mxu0 %v2146
  %3423 = vmatmul.mubr.bf16.gmra.mrb[0].mxu0 %v2145
  %v3424 = vpop.f32.mrb[0].mxu0
  %v3425 = vadd.f32 %v644, %v3424
  %v3426 = vpop.f32.mrb[0].mxu0
  %v3427 = vpop.f32.mrb[0].mxu0
  %v3428 = vadd.f32 %v644, %v3427
  %v3429 = vpop.f32.mrb[0].mxu0
  %3430 = vmatprep.mubr.bf16.mxu0 %v2153
  %3431 = vmatmul.mubr.bf16.gmra.mrb[0].mxu0 %v2152
  %v3432 = vpop.f32.mrb[0].mxu0
  %v3433 = vadd.f32 %v644, %v3432
  %v3434 = vpop.f32.mrb[0].mxu0
  %v3435 = vpop.f32.mrb[0].mxu0
  %v3436 = vadd.f32 %v644, %v3435
  %v3437 = vpop.f32.mrb[0].mxu0
  %3438 = vmatprep.mubr.bf16.mxu0 %v2160
  %3439 = vmatmul.mubr.bf16.gmra.mrb[0].mxu0 %v2159
  %v3440 = vpop.f32.mrb[0].mxu0
  %v3441 = vadd.f32 %v644, %v3440
  %v3442 = vpop.f32.mrb[0].mxu0
  %v3443 = vpop.f32.mrb[0].mxu0
  %v3444 = vadd.f32 %v644, %v3443
  %v3445 = vpop.f32.mrb[0].mxu0
  %3446 = vmatprep.mubr.bf16.mxu0 %v2167
  %3447 = vmatmul.mubr.bf16.gmra.mrb[0].mxu0 %v2166
  %v3448 = vpop.f32.mrb[0].mxu0
  %v3449 = vadd.f32 %v644, %v3448
  %v3450 = vpop.f32.mrb[0].mxu0
  %v3451 = vpop.f32.mrb[0].mxu0
  %v3452 = vadd.f32 %v644, %v3451
  %v3453 = vpop.f32.mrb[0].mxu0
  %3454 = vmatprep.mubr.bf16.mxu0 %v2174
  %3455 = vmatmul.mubr.bf16.gmra.mrb[0].mxu0 %v2173
  %v3456 = vpop.f32.mrb[0].mxu0
  %v3457 = vadd.f32 %v644, %v3456
  %v3458 = vpop.f32.mrb[0].mxu0
  %v3459 = vpop.f32.mrb[0].mxu0
  %v3460 = vadd.f32 %v644, %v3459
  %v3461 = vpop.f32.mrb[0].mxu0
  %3462 = vmatprep.mubr.bf16.mxu0 %v2181
  %3463 = vmatmul.mubr.bf16.gmra.mrb[0].mxu0 %v2180
  %v3464 = vpop.f32.mrb[0].mxu0
  %v3465 = vadd.f32 %v644, %v3464
  %v3466 = vpop.f32.mrb[0].mxu0
  %v3467 = vpop.f32.mrb[0].mxu0
  %v3468 = vadd.f32 %v644, %v3467
  %v3469 = vpop.f32.mrb[0].mxu0
  %3470 = vmatprep.mubr.bf16.mxu0 %v2188
  %3471 = vmatmul.mubr.bf16.gmra.mrb[0].mxu0 %v2187
  %v3472 = vpop.f32.mrb[0].mxu0
  %v3473 = vadd.f32 %v644, %v3472
  %v3474 = vpop.f32.mrb[0].mxu0
  %v3475 = vpop.f32.mrb[0].mxu0
  %v3476 = vadd.f32 %v644, %v3475
  %v3477 = vpop.f32.mrb[0].mxu0
  %3478 = vmatprep.mubr.bf16.mxu0 %v2195
  %3479 = vmatmul.mubr.bf16.gmra.mrb[0].mxu0 %v2194
  %v3480 = vpop.f32.mrb[0].mxu0
  %v3481 = vadd.f32 %v644, %v3480
  %v3482 = vpop.f32.mrb[0].mxu0
  %v3483 = vpop.f32.mrb[0].mxu0
  %v3484 = vadd.f32 %v644, %v3483
  %v3485 = vpop.f32.mrb[0].mxu0
  %3486 = vmatprep.mubr.bf16.mxu0 %v2202
  %3487 = vmatmul.mubr.bf16.gmra.mrb[0].mxu0 %v2201
  %v3488 = vpop.f32.mrb[0].mxu0
  %v3489 = vadd.f32 %v644, %v3488
  %v3490 = vpop.f32.mrb[0].mxu0
  %v3491 = vpop.f32.mrb[0].mxu0
  %v3492 = vadd.f32 %v644, %v3491
  %v3493 = vpop.f32.mrb[0].mxu0
  %3494 = vmatprep.mubr.bf16.mxu0 %v2209
  %3495 = vmatmul.mubr.bf16.gmra.mrb[0].mxu0 %v2208
  %v3496 = vpop.f32.mrb[0].mxu0
  %v3497 = vadd.f32 %v644, %v3496
  %v3498 = vpop.f32.mrb[0].mxu0
  %v3499 = vpop.f32.mrb[0].mxu0
  %v3500 = vadd.f32 %v644, %v3499
  %v3501 = vpop.f32.mrb[0].mxu0
  %3502 = vmatprep.mubr.bf16.mxu0 %v2216
  %3503 = vmatmul.mubr.bf16.gmra.mrb[0].mxu0 %v2215
  %v3504 = vpop.f32.mrb[0].mxu0
  %v3505 = vadd.f32 %v644, %v3504
  %v3506 = vpop.f32.mrb[0].mxu0
  %v3507 = vpop.f32.mrb[0].mxu0
  %v3508 = vadd.f32 %v644, %v3507
  %v3509 = vpop.f32.mrb[0].mxu0
  %3510 = vmatprep.mubr.bf16.mxu0 %v2223
  %3511 = vmatmul.mubr.bf16.gmra.mrb[0].mxu0 %v2222
  %v3512 = vpop.f32.mrb[0].mxu0
  %v3513 = vadd.f32 %v644, %v3512
  %v3514 = vpop.f32.mrb[0].mxu0
  %v3515 = vpop.f32.mrb[0].mxu0
  %v3516 = vadd.f32 %v644, %v3515
  %v3517 = vpop.f32.mrb[0].mxu0
  %3518 = vmatprep.mubr.bf16.mxu0 %v2230
  %3519 = vmatmul.mubr.bf16.gmra.mrb[0].mxu0 %v2229
  %v3520 = vpop.f32.mrb[0].mxu0
  %v3521 = vadd.f32 %v644, %v3520
  %v3522 = vpop.f32.mrb[0].mxu0
  %v3523 = vpop.f32.mrb[0].mxu0
  %v3524 = vadd.f32 %v644, %v3523
  %v3525 = vpop.f32.mrb[0].mxu0
  %3526 = vmatprep.mubr.bf16.mxu0 %v2237
  %3527 = vmatmul.mubr.bf16.gmra.mrb[0].mxu0 %v2236
  %v3528 = vpop.f32.mrb[0].mxu0
  %v3529 = vadd.f32 %v644, %v3528
  %v3530 = vpop.f32.mrb[0].mxu0
  %v3531 = vpop.f32.mrb[0].mxu0
  %v3532 = vadd.f32 %v644, %v3531
  %v3533 = vpop.f32.mrb[0].mxu0
  %3534 = vmatprep.mubr.bf16.mxu0 %v2244
  %3535 = vmatmul.mubr.bf16.gmra.mrb[0].mxu0 %v2243
  %v3536 = vpop.f32.mrb[0].mxu0
  %v3537 = vadd.f32 %v644, %v3536
  %v3538 = vpop.f32.mrb[0].mxu0
  %v3539 = vpop.f32.mrb[0].mxu0
  %v3540 = vadd.f32 %v644, %v3539
  %v3541 = vpop.f32.mrb[0].mxu0
  %3542 = vmatprep.mubr.bf16.mxu0 %v2251
  %3543 = vmatmul.mubr.bf16.gmra.mrb[0].mxu0 %v2250
  %v3544 = vpop.f32.mrb[0].mxu0
  %v3545 = vadd.f32 %v644, %v3544
  %v3546 = vpop.f32.mrb[0].mxu0
  %v3547 = vpop.f32.mrb[0].mxu0
  %v3548 = vadd.f32 %v644, %v3547
  %v3549 = vpop.f32.mrb[0].mxu0
  %3550 = vmatprep.mubr.bf16.mxu0 %v2258
  %3551 = vmatmul.mubr.bf16.gmra.mrb[0].mxu0 %v2257
  %v3552 = vpop.f32.mrb[0].mxu0
  %v3553 = vadd.f32 %v644, %v3552
  %v3554 = vpop.f32.mrb[0].mxu0
  %v3555 = vpop.f32.mrb[0].mxu0
  %v3556 = vadd.f32 %v644, %v3555
  %v3557 = vpop.f32.mrb[0].mxu0
  %3558 = vmatprep.mubr.bf16.mxu0 %v2265
  %3559 = vmatmul.mubr.bf16.gmra.mrb[0].mxu0 %v2264
  %v3560 = vpop.f32.mrb[0].mxu0
  %v3561 = vadd.f32 %v644, %v3560
  %v3562 = vpop.f32.mrb[0].mxu0
  %v3563 = vpop.f32.mrb[0].mxu0
  %v3564 = vadd.f32 %v644, %v3563
  %v3565 = vpop.f32.mrb[0].mxu0
  %3566 = vmatprep.mubr.bf16.mxu0 %v2272
  %3567 = vmatmul.mubr.bf16.gmra.mrb[0].mxu0 %v2271
  %v3568 = vpop.f32.mrb[0].mxu0
  %v3569 = vadd.f32 %v644, %v3568
  %v3570 = vpop.f32.mrb[0].mxu0
  %v3571 = vpop.f32.mrb[0].mxu0
  %v3572 = vadd.f32 %v644, %v3571
  %v3573 = vpop.f32.mrb[0].mxu0
  %3574 = vmatprep.mubr.bf16.mxu0 %v2279
  %3575 = vmatmul.mubr.bf16.gmra.mrb[0].mxu0 %v2278
  %v3576 = vpop.f32.mrb[0].mxu0
  %v3577 = vadd.f32 %v644, %v3576
  %v3578 = vpop.f32.mrb[0].mxu0
  %v3579 = vpop.f32.mrb[0].mxu0
  %v3580 = vadd.f32 %v644, %v3579
  %v3581 = vpop.f32.mrb[0].mxu0
  %3582 = vmatprep.mubr.bf16.mxu0 %v2286
  %3583 = vmatmul.mubr.bf16.gmra.mrb[0].mxu0 %v2285
  %v3584 = vpop.f32.mrb[0].mxu0
  %v3585 = vadd.f32 %v644, %v3584
  %v3586 = vpop.f32.mrb[0].mxu0
  %v3587 = vpop.f32.mrb[0].mxu0
  %v3588 = vadd.f32 %v644, %v3587
  %v3589 = vpop.f32.mrb[0].mxu0
  %3590 = vmatprep.mubr.bf16.mxu0 %v2293
  %3591 = vmatmul.mubr.bf16.gmra.mrb[0].mxu0 %v2292
  %v3592 = vpop.f32.mrb[0].mxu0
  %v3593 = vadd.f32 %v644, %v3592
  %v3594 = vpop.f32.mrb[0].mxu0
  %v3595 = vpop.f32.mrb[0].mxu0
  %v3596 = vadd.f32 %v644, %v3595
  %v3597 = vpop.f32.mrb[0].mxu0
  %3598 = vmatprep.mubr.bf16.mxu0 %v2300
  %3599 = vmatmul.mubr.bf16.gmra.mrb[0].mxu0 %v2299
  %v3600 = vpop.f32.mrb[0].mxu0
  %v3601 = vadd.f32 %v644, %v3600
  %v3602 = vpop.f32.mrb[0].mxu0
  %v3603 = vpop.f32.mrb[0].mxu0
  %v3604 = vadd.f32 %v644, %v3603
  %v3605 = vpop.f32.mrb[0].mxu0
  %3606 = vmatprep.mubr.bf16.mxu0 %v2307
  %3607 = vmatmul.mubr.bf16.gmra.mrb[0].mxu0 %v2306
  %v3608 = vpop.f32.mrb[0].mxu0
  %v3609 = vadd.f32 %v644, %v3608
  %v3610 = vpop.f32.mrb[0].mxu0
  %v3611 = vpop.f32.mrb[0].mxu0
  %v3612 = vadd.f32 %v644, %v3611
  %v3613 = vpop.f32.mrb[0].mxu0
  %3614 = vmatprep.mubr.bf16.mxu0 %v2314
  %3615 = vmatmul.mubr.bf16.gmra.mrb[0].mxu0 %v2313
  %v3616 = vpop.f32.mrb[0].mxu0
  %v3617 = vadd.f32 %v644, %v3616
  %v3618 = vpop.f32.mrb[0].mxu0
  %v3619 = vpop.f32.mrb[0].mxu0
  %v3620 = vadd.f32 %v644, %v3619
  %v3621 = vpop.f32.mrb[0].mxu0
  %3622 = vmatprep.mubr.bf16.mxu0 %v2321
  %3623 = vmatmul.mubr.bf16.gmra.mrb[0].mxu0 %v2320
  %v3624 = vpop.f32.mrb[0].mxu0
  %v3625 = vadd.f32 %v644, %v3624
  %v3626 = vpop.f32.mrb[0].mxu0
  %v3627 = vpop.f32.mrb[0].mxu0
  %v3628 = vadd.f32 %v644, %v3627
  %v3629 = vpop.f32.mrb[0].mxu0
  %3630 = vmatprep.mubr.bf16.mxu0 %v2328
  %3631 = vmatmul.mubr.bf16.gmra.mrb[0].mxu0 %v2327
  %v3632 = vpop.f32.mrb[0].mxu0
  %v3633 = vadd.f32 %v644, %v3632
  %v3634 = vpop.f32.mrb[0].mxu0
  %v3635 = vpop.f32.mrb[0].mxu0
  %v3636 = vadd.f32 %v644, %v3635
  %v3637 = vpop.f32.mrb[0].mxu0
  %3638 = vmatprep.mubr.bf16.mxu0 %v2335
  %3639 = vmatmul.mubr.bf16.gmra.mrb[0].mxu0 %v2334
  %v3640 = vpop.f32.mrb[0].mxu0
  %v3641 = vadd.f32 %v644, %v3640
  %v3642 = vpop.f32.mrb[0].mxu0
  %v3643 = vpop.f32.mrb[0].mxu0
  %v3644 = vadd.f32 %v644, %v3643
  %v3645 = vpop.f32.mrb[0].mxu0
  %3646 = vmatprep.mubr.bf16.mxu0 %v2342
  %3647 = vmatmul.mubr.bf16.gmra.mrb[0].mxu0 %v2341
  %v3648 = vpop.f32.mrb[0].mxu0
  %v3649 = vadd.f32 %v644, %v3648
  %v3650 = vpop.f32.mrb[0].mxu0
  %v3651 = vpop.f32.mrb[0].mxu0
  %v3652 = vadd.f32 %v644, %v3651
  %v3653 = vpop.f32.mrb[0].mxu0
  %3654 = vmatprep.mubr.bf16.mxu0 %v2349
  %3655 = vmatmul.mubr.bf16.gmra.mrb[0].mxu0 %v2348
  %v3656 = vpop.f32.mrb[0].mxu0
  %v3657 = vadd.f32 %v644, %v3656
  %v3658 = vpop.f32.mrb[0].mxu0
  %v3659 = vpop.f32.mrb[0].mxu0
  %v3660 = vadd.f32 %v644, %v3659
  %v3661 = vpop.f32.mrb[0].mxu0
  %3662 = vmatprep.mubr.bf16.mxu0 %v2356
  %3663 = vmatmul.mubr.bf16.gmra.mrb[0].mxu0 %v2355
  %v3664 = vpop.f32.mrb[0].mxu0
  %v3665 = vadd.f32 %v644, %v3664
  %v3666 = vpop.f32.mrb[0].mxu0
  %v3667 = vpop.f32.mrb[0].mxu0
  %v3668 = vadd.f32 %v644, %v3667
  %v3669 = vpop.f32.mrb[0].mxu0
  %3670 = vmatprep.mubr.bf16.mxu0 %v2363
  %3671 = vmatmul.mubr.bf16.gmra.mrb[0].mxu0 %v2362
  %v3672 = vpop.f32.mrb[0].mxu0
  %v3673 = vadd.f32 %v644, %v3672
  %v3674 = vpop.f32.mrb[0].mxu0
  %v3675 = vpop.f32.mrb[0].mxu0
  %v3676 = vadd.f32 %v644, %v3675
  %v3677 = vpop.f32.mrb[0].mxu0
  %3678 = vmatprep.mubr.bf16.mxu0 %v2370
  %3679 = vmatmul.mubr.bf16.gmra.mrb[0].mxu0 %v2369
  %v3680 = vpop.f32.mrb[0].mxu0
  %v3681 = vadd.f32 %v644, %v3680
  %v3682 = vpop.f32.mrb[0].mxu0
  %v3683 = vpop.f32.mrb[0].mxu0
  %v3684 = vadd.f32 %v644, %v3683
  %v3685 = vpop.f32.mrb[0].mxu0
  %3686 = vmatprep.mubr.bf16.mxu0 %v2377
  %3687 = vmatmul.mubr.bf16.gmra.mrb[0].mxu0 %v2376
  %v3688 = vpop.f32.mrb[0].mxu0
  %v3689 = vadd.f32 %v644, %v3688
  %v3690 = vpop.f32.mrb[0].mxu0
  %v3691 = vpop.f32.mrb[0].mxu0
  %v3692 = vadd.f32 %v644, %v3691
  %v3693 = vpop.f32.mrb[0].mxu0
  %3694 = vmatprep.mubr.bf16.mxu0 %v2384
  %3695 = vmatmul.mubr.bf16.gmra.mrb[0].mxu0 %v2383
  %v3696 = vpop.f32.mrb[0].mxu0
  %v3697 = vadd.f32 %v644, %v3696
  %v3698 = vpop.f32.mrb[0].mxu0
  %v3699 = vpop.f32.mrb[0].mxu0
  %v3700 = vadd.f32 %v644, %v3699
  %v3701 = vpop.f32.mrb[0].mxu0
  %3702 = vmatprep.mubr.bf16.mxu0 %v2391
  %3703 = vmatmul.mubr.bf16.gmra.mrb[0].mxu0 %v2390
  %v3704 = vpop.f32.mrb[0].mxu0
  %v3705 = vadd.f32 %v644, %v3704
  %v3706 = vpop.f32.mrb[0].mxu0
  %v3707 = vpop.f32.mrb[0].mxu0
  %v3708 = vadd.f32 %v644, %v3707
  %v3709 = vpop.f32.mrb[0].mxu0
  %3710 = vmatprep.mubr.bf16.mxu0 %v2398
  %3711 = vmatmul.mubr.bf16.gmra.mrb[0].mxu0 %v2397
  %v3712 = vpop.f32.mrb[0].mxu0
  %v3713 = vadd.f32 %v644, %v3712
  %v3714 = vpop.f32.mrb[0].mxu0
  %v3715 = vpop.f32.mrb[0].mxu0
  %v3716 = vadd.f32 %v644, %v3715
  %v3717 = vpop.f32.mrb[0].mxu0
  %3718 = vmatprep.mubr.bf16.mxu0 %v2405
  %3719 = vmatmul.mubr.bf16.gmra.mrb[0].mxu0 %v2404
  %v3720 = vpop.f32.mrb[0].mxu0
  %v3721 = vadd.f32 %v644, %v3720
  %v3722 = vpop.f32.mrb[0].mxu0
  %v3723 = vpop.f32.mrb[0].mxu0
  %v3724 = vadd.f32 %v644, %v3723
  %v3725 = vpop.f32.mrb[0].mxu0
  %3726 = vmatprep.mubr.bf16.mxu0 %v2412
  %3727 = vmatmul.mubr.bf16.gmra.mrb[0].mxu0 %v2411
  %v3728 = vpop.f32.mrb[0].mxu0
  %v3729 = vadd.f32 %v644, %v3728
  %v3730 = vpop.f32.mrb[0].mxu0
  %v3731 = vpop.f32.mrb[0].mxu0
  %v3732 = vadd.f32 %v644, %v3731
  %v3733 = vpop.f32.mrb[0].mxu0
  %3734 = vmatprep.mubr.bf16.mxu0 %v2419
  %3735 = vmatmul.mubr.bf16.gmra.mrb[0].mxu0 %v2418
  %v3736 = vpop.f32.mrb[0].mxu0
  %v3737 = vadd.f32 %v644, %v3736
  %v3738 = vpop.f32.mrb[0].mxu0
  %v3739 = vpop.f32.mrb[0].mxu0
  %v3740 = vadd.f32 %v644, %v3739
  %v3741 = vpop.f32.mrb[0].mxu0
  %3742 = vmatprep.mubr.bf16.mxu0 %v2426
  %3743 = vmatmul.mubr.bf16.gmra.mrb[0].mxu0 %v2425
  %v3744 = vpop.f32.mrb[0].mxu0
  %v3745 = vadd.f32 %v644, %v3744
  %v3746 = vpop.f32.mrb[0].mxu0
  %v3747 = vpop.f32.mrb[0].mxu0
  %v3748 = vadd.f32 %v644, %v3747
  %v3749 = vpop.f32.mrb[0].mxu0
  %3750 = vmatprep.mubr.bf16.mxu0 %v2433
  %3751 = vmatmul.mubr.bf16.gmra.mrb[0].mxu0 %v2432
  %v3752 = vpop.f32.mrb[0].mxu0
  %v3753 = vadd.f32 %v644, %v3752
  %v3754 = vpop.f32.mrb[0].mxu0
  %v3755 = vpop.f32.mrb[0].mxu0
  %v3756 = vadd.f32 %v644, %v3755
  %v3757 = vpop.f32.mrb[0].mxu0
  %3758 = vmatprep.mubr.bf16.mxu0 %v2440
  %3759 = vmatmul.mubr.bf16.gmra.mrb[0].mxu0 %v2439
  %v3760 = vpop.f32.mrb[0].mxu0
  %v3761 = vadd.f32 %v644, %v3760
  %v3762 = vpop.f32.mrb[0].mxu0
  %v3763 = vpop.f32.mrb[0].mxu0
  %v3764 = vadd.f32 %v644, %v3763
  %v3765 = vpop.f32.mrb[0].mxu0
  %3766 = vmatprep.mubr.bf16.mxu0 %v2447
  %3767 = vmatmul.mubr.bf16.gmra.mrb[0].mxu0 %v2446
  %v3768 = vpop.f32.mrb[0].mxu0
  %v3769 = vadd.f32 %v644, %v3768
  %v3770 = vpop.f32.mrb[0].mxu0
  %v3771 = vpop.f32.mrb[0].mxu0
  %v3772 = vadd.f32 %v644, %v3771
  %v3773 = vpop.f32.mrb[0].mxu0
  %3774 = vmatprep.mubr.bf16.mxu0 %v2454
  %3775 = vmatmul.mubr.bf16.gmra.mrb[0].mxu0 %v2453
  %v3776 = vpop.f32.mrb[0].mxu0
  %v3777 = vadd.f32 %v644, %v3776
  %v3778 = vpop.f32.mrb[0].mxu0
  %v3779 = vpop.f32.mrb[0].mxu0
  %v3780 = vadd.f32 %v644, %v3779
  %v3781 = vpop.f32.mrb[0].mxu0
  %3782 = vmatprep.mubr.bf16.mxu0 %v2461
  %3783 = vmatmul.mubr.bf16.gmra.mrb[0].mxu0 %v2460
  %v3784 = vpop.f32.mrb[0].mxu0
  %v3785 = vadd.f32 %v644, %v3784
  %v3786 = vpop.f32.mrb[0].mxu0
  %v3787 = vpop.f32.mrb[0].mxu0
  %v3788 = vadd.f32 %v644, %v3787
  %v3789 = vpop.f32.mrb[0].mxu0
  %3790 = vmatprep.mubr.bf16.mxu0 %v2468
  %3791 = vmatmul.mubr.bf16.gmra.mrb[0].mxu0 %v2467
  %v3792 = vpop.f32.mrb[0].mxu0
  %v3793 = vadd.f32 %v644, %v3792
  %v3794 = vpop.f32.mrb[0].mxu0
  %v3795 = vpop.f32.mrb[0].mxu0
  %v3796 = vadd.f32 %v644, %v3795
  %v3797 = vpop.f32.mrb[0].mxu0
  %3798 = vmatprep.mubr.bf16.mxu0 %v2475
  %3799 = vmatmul.mubr.bf16.gmra.mrb[0].mxu0 %v2474
  %v3800 = vpop.f32.mrb[0].mxu0
  %v3801 = vadd.f32 %v644, %v3800
  %v3802 = vpop.f32.mrb[0].mxu0
  %v3803 = vpop.f32.mrb[0].mxu0
  %v3804 = vadd.f32 %v644, %v3803
  %v3805 = vpop.f32.mrb[0].mxu0
  %3806 = vmatprep.mubr.bf16.mxu0 %v2482
  %3807 = vmatmul.mubr.bf16.gmra.mrb[0].mxu0 %v2481
  %v3808 = vpop.f32.mrb[0].mxu0
  %v3809 = vadd.f32 %v644, %v3808
  %v3810 = vpop.f32.mrb[0].mxu0
  %v3811 = vpop.f32.mrb[0].mxu0
  %v3812 = vadd.f32 %v644, %v3811
  %v3813 = vpop.f32.mrb[0].mxu0
  %3814 = vmatprep.mubr.bf16.mxu0 %v2489
  %3815 = vmatmul.mubr.bf16.gmra.mrb[0].mxu0 %v2488
  %v3816 = vpop.f32.mrb[0].mxu0
  %v3817 = vadd.f32 %v644, %v3816
  %v3818 = vpop.f32.mrb[0].mxu0
  %v3819 = vpop.f32.mrb[0].mxu0
  %v3820 = vadd.f32 %v644, %v3819
  %v3821 = vpop.f32.mrb[0].mxu0
  %3822 = vmatprep.mubr.bf16.mxu0 %v2496
  %3823 = vmatmul.mubr.bf16.gmra.mrb[0].mxu0 %v2495
  %v3824 = vpop.f32.mrb[0].mxu0
  %v3825 = vadd.f32 %v644, %v3824
  %v3826 = vpop.f32.mrb[0].mxu0
  %v3827 = vpop.f32.mrb[0].mxu0
  %v3828 = vadd.f32 %v644, %v3827
  %v3829 = vpop.f32.mrb[0].mxu0
  %3830 = vdwg.mxu0
  %3831 = vmatprep.subr.bf16.mxu0 0
  %3832 = vmatpush1.bf16.msra.mxu0 %v3190
  %3833 = vmatprep.subr.bf16.mxu0 0
  %3834 = vmatpush1.bf16.msra.mxu0 %v3191
  %3835 = vmatprep.subr.bf16.mxu0 0
  %3836 = vmatpush1.bf16.msra.mxu0 %v3192
  %3837 = vmatprep.subr.bf16.mxu0 0
  %3838 = vmatpush1.bf16.msra.mxu0 %v3193
  %3839 = vmatprep.subr.bf16.mxu0 0
  %3840 = vmatpush1.bf16.msra.mxu0 %v3194
  %3841 = vmatprep.subr.bf16.mxu0 0
  %3842 = vmatpush1.bf16.msra.mxu0 %v3195
  %3843 = vmatprep.subr.bf16.mxu0 0
  %3844 = vmatpush1.bf16.msra.mxu0 %v3196
  %3845 = vmatprep.subr.bf16.mxu0 0
  %3846 = vmatpush1.bf16.msra.mxu0 %v3197
  %3847 = vmatprep.subr.bf16.mxu0 0
  %3848 = vmatpush1.bf16.msra.mxu0 %v3198
  %3849 = vmatprep.subr.bf16.mxu0 0
  %3850 = vmatpush1.bf16.msra.mxu0 %v3199
  %3851 = vmatprep.subr.bf16.mxu0 0
  %3852 = vmatpush1.bf16.msra.mxu0 %v3200
  %3853 = vmatprep.subr.bf16.mxu0 0
  %3854 = vmatpush1.bf16.msra.mxu0 %v3201
  %3855 = vmatprep.subr.bf16.mxu0 0
  %3856 = vmatpush1.bf16.msra.mxu0 %v3202
  %3857 = vmatprep.subr.bf16.mxu0 0
  %3858 = vmatpush1.bf16.msra.mxu0 %v3203
  %3859 = vmatprep.subr.bf16.mxu0 0
  %3860 = vmatpush1.bf16.msra.mxu0 %v3204
  %3861 = vmatprep.subr.bf16.mxu0 0
  %3862 = vmatpush1.bf16.msra.mxu0 %v3205
  %3863 = vmatprep.mubr.bf16.mxu0 %v2057
  %3864 = vmatmul.mubr.bf16.gmra.mrb[0].mxu0 %v2056
  %v3865 = vpop.f32.mrb[0].mxu0
  %v3866 = vadd.f32 %v3321, %v3865
  %v3867 = vpop.f32.mrb[0].mxu0
  %v3868 = vpop.f32.mrb[0].mxu0
  %v3869 = vadd.f32 %v3324, %v3868
  %v3870 = vpop.f32.mrb[0].mxu0
  %3871 = vmatprep.mubr.bf16.mxu0 %v2064
  %3872 = vmatmul.mubr.bf16.gmra.mrb[0].mxu0 %v2063
  %v3873 = vpop.f32.mrb[0].mxu0
  %v3874 = vadd.f32 %v3329, %v3873
  %v3875 = vpop.f32.mrb[0].mxu0
  %v3876 = vpop.f32.mrb[0].mxu0
  %v3877 = vadd.f32 %v3332, %v3876
  %v3878 = vpop.f32.mrb[0].mxu0
  %3879 = vmatprep.mubr.bf16.mxu0 %v2071
  %3880 = vmatmul.mubr.bf16.gmra.mrb[0].mxu0 %v2070
  %v3881 = vpop.f32.mrb[0].mxu0
  %v3882 = vadd.f32 %v3337, %v3881
  %v3883 = vpop.f32.mrb[0].mxu0
  %v3884 = vpop.f32.mrb[0].mxu0
  %v3885 = vadd.f32 %v3340, %v3884
  %v3886 = vpop.f32.mrb[0].mxu0
  %3887 = vmatprep.mubr.bf16.mxu0 %v2078
  %3888 = vmatmul.mubr.bf16.gmra.mrb[0].mxu0 %v2077
  %v3889 = vpop.f32.mrb[0].mxu0
  %v3890 = vadd.f32 %v3345, %v3889
  %v3891 = vpop.f32.mrb[0].mxu0
  %v3892 = vpop.f32.mrb[0].mxu0
  %v3893 = vadd.f32 %v3348, %v3892
  %v3894 = vpop.f32.mrb[0].mxu0
  %3895 = vmatprep.mubr.bf16.mxu0 %v2085
  %3896 = vmatmul.mubr.bf16.gmra.mrb[0].mxu0 %v2084
  %v3897 = vpop.f32.mrb[0].mxu0
  %v3898 = vadd.f32 %v3353, %v3897
  %v3899 = vpop.f32.mrb[0].mxu0
  %v3900 = vpop.f32.mrb[0].mxu0
  %v3901 = vadd.f32 %v3356, %v3900
  %v3902 = vpop.f32.mrb[0].mxu0
  %3903 = vmatprep.mubr.bf16.mxu0 %v2092
  %3904 = vmatmul.mubr.bf16.gmra.mrb[0].mxu0 %v2091
  %v3905 = vpop.f32.mrb[0].mxu0
  %v3906 = vadd.f32 %v3361, %v3905
  %v3907 = vpop.f32.mrb[0].mxu0
  %v3908 = vpop.f32.mrb[0].mxu0
  %v3909 = vadd.f32 %v3364, %v3908
  %v3910 = vpop.f32.mrb[0].mxu0
  %3911 = vmatprep.mubr.bf16.mxu0 %v2099
  %3912 = vmatmul.mubr.bf16.gmra.mrb[0].mxu0 %v2098
  %v3913 = vpop.f32.mrb[0].mxu0
  %v3914 = vadd.f32 %v3369, %v3913
  %v3915 = vpop.f32.mrb[0].mxu0
  %v3916 = vpop.f32.mrb[0].mxu0
  %v3917 = vadd.f32 %v3372, %v3916
  %v3918 = vpop.f32.mrb[0].mxu0
  %3919 = vmatprep.mubr.bf16.mxu0 %v2106
  %3920 = vmatmul.mubr.bf16.gmra.mrb[0].mxu0 %v2105
  %v3921 = vpop.f32.mrb[0].mxu0
  %v3922 = vadd.f32 %v3377, %v3921
  %v3923 = vpop.f32.mrb[0].mxu0
  %v3924 = vpop.f32.mrb[0].mxu0
  %v3925 = vadd.f32 %v3380, %v3924
  %v3926 = vpop.f32.mrb[0].mxu0
  %3927 = vmatprep.mubr.bf16.mxu0 %v2113
  %3928 = vmatmul.mubr.bf16.gmra.mrb[0].mxu0 %v2112
  %v3929 = vpop.f32.mrb[0].mxu0
  %v3930 = vadd.f32 %v3385, %v3929
  %v3931 = vpop.f32.mrb[0].mxu0
  %v3932 = vpop.f32.mrb[0].mxu0
  %v3933 = vadd.f32 %v3388, %v3932
  %v3934 = vpop.f32.mrb[0].mxu0
  %3935 = vmatprep.mubr.bf16.mxu0 %v2120
  %3936 = vmatmul.mubr.bf16.gmra.mrb[0].mxu0 %v2119
  %v3937 = vpop.f32.mrb[0].mxu0
  %v3938 = vadd.f32 %v3393, %v3937
  %v3939 = vpop.f32.mrb[0].mxu0
  %v3940 = vpop.f32.mrb[0].mxu0
  %v3941 = vadd.f32 %v3396, %v3940
  %v3942 = vpop.f32.mrb[0].mxu0
  %3943 = vmatprep.mubr.bf16.mxu0 %v2127
  %3944 = vmatmul.mubr.bf16.gmra.mrb[0].mxu0 %v2126
  %v3945 = vpop.f32.mrb[0].mxu0
  %v3946 = vadd.f32 %v3401, %v3945
  %v3947 = vpop.f32.mrb[0].mxu0
  %v3948 = vpop.f32.mrb[0].mxu0
  %v3949 = vadd.f32 %v3404, %v3948
  %v3950 = vpop.f32.mrb[0].mxu0
  %3951 = vmatprep.mubr.bf16.mxu0 %v2134
  %3952 = vmatmul.mubr.bf16.gmra.mrb[0].mxu0 %v2133
  %v3953 = vpop.f32.mrb[0].mxu0
  %v3954 = vadd.f32 %v3409, %v3953
  %v3955 = vpop.f32.mrb[0].mxu0
  %v3956 = vpop.f32.mrb[0].mxu0
  %v3957 = vadd.f32 %v3412, %v3956
  %v3958 = vpop.f32.mrb[0].mxu0
  %3959 = vmatprep.mubr.bf16.mxu0 %v2141
  %3960 = vmatmul.mubr.bf16.gmra.mrb[0].mxu0 %v2140
  %v3961 = vpop.f32.mrb[0].mxu0
  %v3962 = vadd.f32 %v3417, %v3961
  %v3963 = vpop.f32.mrb[0].mxu0
  %v3964 = vpop.f32.mrb[0].mxu0
  %v3965 = vadd.f32 %v3420, %v3964
  %v3966 = vpop.f32.mrb[0].mxu0
  %3967 = vmatprep.mubr.bf16.mxu0 %v2148
  %3968 = vmatmul.mubr.bf16.gmra.mrb[0].mxu0 %v2147
  %v3969 = vpop.f32.mrb[0].mxu0
  %v3970 = vadd.f32 %v3425, %v3969
  %v3971 = vpop.f32.mrb[0].mxu0
  %v3972 = vpop.f32.mrb[0].mxu0
  %v3973 = vadd.f32 %v3428, %v3972
  %v3974 = vpop.f32.mrb[0].mxu0
  %3975 = vmatprep.mubr.bf16.mxu0 %v2155
  %3976 = vmatmul.mubr.bf16.gmra.mrb[0].mxu0 %v2154
  %v3977 = vpop.f32.mrb[0].mxu0
  %v3978 = vadd.f32 %v3433, %v3977
  %v3979 = vpop.f32.mrb[0].mxu0
  %v3980 = vpop.f32.mrb[0].mxu0
  %v3981 = vadd.f32 %v3436, %v3980
  %v3982 = vpop.f32.mrb[0].mxu0
  %3983 = vmatprep.mubr.bf16.mxu0 %v2162
  %3984 = vmatmul.mubr.bf16.gmra.mrb[0].mxu0 %v2161
  %v3985 = vpop.f32.mrb[0].mxu0
  %v3986 = vadd.f32 %v3441, %v3985
  %v3987 = vpop.f32.mrb[0].mxu0
  %v3988 = vpop.f32.mrb[0].mxu0
  %v3989 = vadd.f32 %v3444, %v3988
  %v3990 = vpop.f32.mrb[0].mxu0
  %3991 = vmatprep.mubr.bf16.mxu0 %v2169
  %3992 = vmatmul.mubr.bf16.gmra.mrb[0].mxu0 %v2168
  %v3993 = vpop.f32.mrb[0].mxu0
  %v3994 = vadd.f32 %v3449, %v3993
  %v3995 = vpop.f32.mrb[0].mxu0
  %v3996 = vpop.f32.mrb[0].mxu0
  %v3997 = vadd.f32 %v3452, %v3996
  %v3998 = vpop.f32.mrb[0].mxu0
  %3999 = vmatprep.mubr.bf16.mxu0 %v2176
  %4000 = vmatmul.mubr.bf16.gmra.mrb[0].mxu0 %v2175
  %v4001 = vpop.f32.mrb[0].mxu0
  %v4002 = vadd.f32 %v3457, %v4001
  %v4003 = vpop.f32.mrb[0].mxu0
  %v4004 = vpop.f32.mrb[0].mxu0
  %v4005 = vadd.f32 %v3460, %v4004
  %v4006 = vpop.f32.mrb[0].mxu0
  %4007 = vmatprep.mubr.bf16.mxu0 %v2183
  %4008 = vmatmul.mubr.bf16.gmra.mrb[0].mxu0 %v2182
  %v4009 = vpop.f32.mrb[0].mxu0
  %v4010 = vadd.f32 %v3465, %v4009
  %v4011 = vpop.f32.mrb[0].mxu0
  %v4012 = vpop.f32.mrb[0].mxu0
  %v4013 = vadd.f32 %v3468, %v4012
  %v4014 = vpop.f32.mrb[0].mxu0
  %4015 = vmatprep.mubr.bf16.mxu0 %v2190
  %4016 = vmatmul.mubr.bf16.gmra.mrb[0].mxu0 %v2189
  %v4017 = vpop.f32.mrb[0].mxu0
  %v4018 = vadd.f32 %v3473, %v4017
  %v4019 = vpop.f32.mrb[0].mxu0
  %v4020 = vpop.f32.mrb[0].mxu0
  %v4021 = vadd.f32 %v3476, %v4020
  %v4022 = vpop.f32.mrb[0].mxu0
  %4023 = vmatprep.mubr.bf16.mxu0 %v2197
  %4024 = vmatmul.mubr.bf16.gmra.mrb[0].mxu0 %v2196
  %v4025 = vpop.f32.mrb[0].mxu0
  %v4026 = vadd.f32 %v3481, %v4025
  %v4027 = vpop.f32.mrb[0].mxu0
  %v4028 = vpop.f32.mrb[0].mxu0
  %v4029 = vadd.f32 %v3484, %v4028
  %v4030 = vpop.f32.mrb[0].mxu0
  %4031 = vmatprep.mubr.bf16.mxu0 %v2204
  %4032 = vmatmul.mubr.bf16.gmra.mrb[0].mxu0 %v2203
  %v4033 = vpop.f32.mrb[0].mxu0
  %v4034 = vadd.f32 %v3489, %v4033
  %v4035 = vpop.f32.mrb[0].mxu0
  %v4036 = vpop.f32.mrb[0].mxu0
  %v4037 = vadd.f32 %v3492, %v4036
  %v4038 = vpop.f32.mrb[0].mxu0
  %4039 = vmatprep.mubr.bf16.mxu0 %v2211
  %4040 = vmatmul.mubr.bf16.gmra.mrb[0].mxu0 %v2210
  %v4041 = vpop.f32.mrb[0].mxu0
  %v4042 = vadd.f32 %v3497, %v4041
  %v4043 = vpop.f32.mrb[0].mxu0
  %v4044 = vpop.f32.mrb[0].mxu0
  %v4045 = vadd.f32 %v3500, %v4044
  %v4046 = vpop.f32.mrb[0].mxu0
  %4047 = vmatprep.mubr.bf16.mxu0 %v2218
  %4048 = vmatmul.mubr.bf16.gmra.mrb[0].mxu0 %v2217
  %v4049 = vpop.f32.mrb[0].mxu0
  %v4050 = vadd.f32 %v3505, %v4049
  %v4051 = vpop.f32.mrb[0].mxu0
  %v4052 = vpop.f32.mrb[0].mxu0
  %v4053 = vadd.f32 %v3508, %v4052
  %v4054 = vpop.f32.mrb[0].mxu0
  %4055 = vmatprep.mubr.bf16.mxu0 %v2225
  %4056 = vmatmul.mubr.bf16.gmra.mrb[0].mxu0 %v2224
  %v4057 = vpop.f32.mrb[0].mxu0
  %v4058 = vadd.f32 %v3513, %v4057
  %v4059 = vpop.f32.mrb[0].mxu0
  %v4060 = vpop.f32.mrb[0].mxu0
  %v4061 = vadd.f32 %v3516, %v4060
  %v4062 = vpop.f32.mrb[0].mxu0
  %4063 = vmatprep.mubr.bf16.mxu0 %v2232
  %4064 = vmatmul.mubr.bf16.gmra.mrb[0].mxu0 %v2231
  %v4065 = vpop.f32.mrb[0].mxu0
  %v4066 = vadd.f32 %v3521, %v4065
  %v4067 = vpop.f32.mrb[0].mxu0
  %v4068 = vpop.f32.mrb[0].mxu0
  %v4069 = vadd.f32 %v3524, %v4068
  %v4070 = vpop.f32.mrb[0].mxu0
  %4071 = vmatprep.mubr.bf16.mxu0 %v2239
  %4072 = vmatmul.mubr.bf16.gmra.mrb[0].mxu0 %v2238
  %v4073 = vpop.f32.mrb[0].mxu0
  %v4074 = vadd.f32 %v3529, %v4073
  %v4075 = vpop.f32.mrb[0].mxu0
  %v4076 = vpop.f32.mrb[0].mxu0
  %v4077 = vadd.f32 %v3532, %v4076
  %v4078 = vpop.f32.mrb[0].mxu0
  %4079 = vmatprep.mubr.bf16.mxu0 %v2246
  %4080 = vmatmul.mubr.bf16.gmra.mrb[0].mxu0 %v2245
  %v4081 = vpop.f32.mrb[0].mxu0
  %v4082 = vadd.f32 %v3537, %v4081
  %v4083 = vpop.f32.mrb[0].mxu0
  %v4084 = vpop.f32.mrb[0].mxu0
  %v4085 = vadd.f32 %v3540, %v4084
  %v4086 = vpop.f32.mrb[0].mxu0
  %4087 = vmatprep.mubr.bf16.mxu0 %v2253
  %4088 = vmatmul.mubr.bf16.gmra.mrb[0].mxu0 %v2252
  %v4089 = vpop.f32.mrb[0].mxu0
  %v4090 = vadd.f32 %v3545, %v4089
  %v4091 = vpop.f32.mrb[0].mxu0
  %v4092 = vpop.f32.mrb[0].mxu0
  %v4093 = vadd.f32 %v3548, %v4092
  %v4094 = vpop.f32.mrb[0].mxu0
  %4095 = vmatprep.mubr.bf16.mxu0 %v2260
  %4096 = vmatmul.mubr.bf16.gmra.mrb[0].mxu0 %v2259
  %v4097 = vpop.f32.mrb[0].mxu0
  %v4098 = vadd.f32 %v3553, %v4097
  %v4099 = vpop.f32.mrb[0].mxu0
  %v4100 = vpop.f32.mrb[0].mxu0
  %v4101 = vadd.f32 %v3556, %v4100
  %v4102 = vpop.f32.mrb[0].mxu0
  %4103 = vmatprep.mubr.bf16.mxu0 %v2267
  %4104 = vmatmul.mubr.bf16.gmra.mrb[0].mxu0 %v2266
  %v4105 = vpop.f32.mrb[0].mxu0
  %v4106 = vadd.f32 %v3561, %v4105
  %v4107 = vpop.f32.mrb[0].mxu0
  %v4108 = vpop.f32.mrb[0].mxu0
  %v4109 = vadd.f32 %v3564, %v4108
  %v4110 = vpop.f32.mrb[0].mxu0
  %4111 = vmatprep.mubr.bf16.mxu0 %v2274
  %4112 = vmatmul.mubr.bf16.gmra.mrb[0].mxu0 %v2273
  %v4113 = vpop.f32.mrb[0].mxu0
  %v4114 = vadd.f32 %v3569, %v4113
  %v4115 = vpop.f32.mrb[0].mxu0
  %v4116 = vpop.f32.mrb[0].mxu0
  %v4117 = vadd.f32 %v3572, %v4116
  %v4118 = vpop.f32.mrb[0].mxu0
  %4119 = vmatprep.mubr.bf16.mxu0 %v2281
  %4120 = vmatmul.mubr.bf16.gmra.mrb[0].mxu0 %v2280
  %v4121 = vpop.f32.mrb[0].mxu0
  %v4122 = vadd.f32 %v3577, %v4121
  %v4123 = vpop.f32.mrb[0].mxu0
  %v4124 = vpop.f32.mrb[0].mxu0
  %v4125 = vadd.f32 %v3580, %v4124
  %v4126 = vpop.f32.mrb[0].mxu0
  %4127 = vmatprep.mubr.bf16.mxu0 %v2288
  %4128 = vmatmul.mubr.bf16.gmra.mrb[0].mxu0 %v2287
  %v4129 = vpop.f32.mrb[0].mxu0
  %v4130 = vadd.f32 %v3585, %v4129
  %v4131 = vpop.f32.mrb[0].mxu0
  %v4132 = vpop.f32.mrb[0].mxu0
  %v4133 = vadd.f32 %v3588, %v4132
  %v4134 = vpop.f32.mrb[0].mxu0
  %4135 = vmatprep.mubr.bf16.mxu0 %v2295
  %4136 = vmatmul.mubr.bf16.gmra.mrb[0].mxu0 %v2294
  %v4137 = vpop.f32.mrb[0].mxu0
  %v4138 = vadd.f32 %v3593, %v4137
  %v4139 = vpop.f32.mrb[0].mxu0
  %v4140 = vpop.f32.mrb[0].mxu0
  %v4141 = vadd.f32 %v3596, %v4140
  %v4142 = vpop.f32.mrb[0].mxu0
  %4143 = vmatprep.mubr.bf16.mxu0 %v2302
  %4144 = vmatmul.mubr.bf16.gmra.mrb[0].mxu0 %v2301
  %v4145 = vpop.f32.mrb[0].mxu0
  %v4146 = vadd.f32 %v3601, %v4145
  %v4147 = vpop.f32.mrb[0].mxu0
  %v4148 = vpop.f32.mrb[0].mxu0
  %v4149 = vadd.f32 %v3604, %v4148
  %v4150 = vpop.f32.mrb[0].mxu0
  %4151 = vmatprep.mubr.bf16.mxu0 %v2309
  %4152 = vmatmul.mubr.bf16.gmra.mrb[0].mxu0 %v2308
  %v4153 = vpop.f32.mrb[0].mxu0
  %v4154 = vadd.f32 %v3609, %v4153
  %v4155 = vpop.f32.mrb[0].mxu0
  %v4156 = vpop.f32.mrb[0].mxu0
  %v4157 = vadd.f32 %v3612, %v4156
  %v4158 = vpop.f32.mrb[0].mxu0
  %4159 = vmatprep.mubr.bf16.mxu0 %v2316
  %4160 = vmatmul.mubr.bf16.gmra.mrb[0].mxu0 %v2315
  %v4161 = vpop.f32.mrb[0].mxu0
  %v4162 = vadd.f32 %v3617, %v4161
  %v4163 = vpop.f32.mrb[0].mxu0
  %v4164 = vpop.f32.mrb[0].mxu0
  %v4165 = vadd.f32 %v3620, %v4164
  %v4166 = vpop.f32.mrb[0].mxu0
  %4167 = vmatprep.mubr.bf16.mxu0 %v2323
  %4168 = vmatmul.mubr.bf16.gmra.mrb[0].mxu0 %v2322
  %v4169 = vpop.f32.mrb[0].mxu0
  %v4170 = vadd.f32 %v3625, %v4169
  %v4171 = vpop.f32.mrb[0].mxu0
  %v4172 = vpop.f32.mrb[0].mxu0
  %v4173 = vadd.f32 %v3628, %v4172
  %v4174 = vpop.f32.mrb[0].mxu0
  %4175 = vmatprep.mubr.bf16.mxu0 %v2330
  %4176 = vmatmul.mubr.bf16.gmra.mrb[0].mxu0 %v2329
  %v4177 = vpop.f32.mrb[0].mxu0
  %v4178 = vadd.f32 %v3633, %v4177
  %v4179 = vpop.f32.mrb[0].mxu0
  %v4180 = vpop.f32.mrb[0].mxu0
  %v4181 = vadd.f32 %v3636, %v4180
  %v4182 = vpop.f32.mrb[0].mxu0
  %4183 = vmatprep.mubr.bf16.mxu0 %v2337
  %4184 = vmatmul.mubr.bf16.gmra.mrb[0].mxu0 %v2336
  %v4185 = vpop.f32.mrb[0].mxu0
  %v4186 = vadd.f32 %v3641, %v4185
  %v4187 = vpop.f32.mrb[0].mxu0
  %v4188 = vpop.f32.mrb[0].mxu0
  %v4189 = vadd.f32 %v3644, %v4188
  %v4190 = vpop.f32.mrb[0].mxu0
  %4191 = vmatprep.mubr.bf16.mxu0 %v2344
  %4192 = vmatmul.mubr.bf16.gmra.mrb[0].mxu0 %v2343
  %v4193 = vpop.f32.mrb[0].mxu0
  %v4194 = vadd.f32 %v3649, %v4193
  %v4195 = vpop.f32.mrb[0].mxu0
  %v4196 = vpop.f32.mrb[0].mxu0
  %v4197 = vadd.f32 %v3652, %v4196
  %v4198 = vpop.f32.mrb[0].mxu0
  %4199 = vmatprep.mubr.bf16.mxu0 %v2351
  %4200 = vmatmul.mubr.bf16.gmra.mrb[0].mxu0 %v2350
  %v4201 = vpop.f32.mrb[0].mxu0
  %v4202 = vadd.f32 %v3657, %v4201
  %v4203 = vpop.f32.mrb[0].mxu0
  %v4204 = vpop.f32.mrb[0].mxu0
  %v4205 = vadd.f32 %v3660, %v4204
  %v4206 = vpop.f32.mrb[0].mxu0
  %4207 = vmatprep.mubr.bf16.mxu0 %v2358
  %4208 = vmatmul.mubr.bf16.gmra.mrb[0].mxu0 %v2357
  %v4209 = vpop.f32.mrb[0].mxu0
  %v4210 = vadd.f32 %v3665, %v4209
  %v4211 = vpop.f32.mrb[0].mxu0
  %v4212 = vpop.f32.mrb[0].mxu0
  %v4213 = vadd.f32 %v3668, %v4212
  %v4214 = vpop.f32.mrb[0].mxu0
  %4215 = vmatprep.mubr.bf16.mxu0 %v2365
  %4216 = vmatmul.mubr.bf16.gmra.mrb[0].mxu0 %v2364
  %v4217 = vpop.f32.mrb[0].mxu0
  %v4218 = vadd.f32 %v3673, %v4217
  %v4219 = vpop.f32.mrb[0].mxu0
  %v4220 = vpop.f32.mrb[0].mxu0
  %v4221 = vadd.f32 %v3676, %v4220
  %v4222 = vpop.f32.mrb[0].mxu0
  %4223 = vmatprep.mubr.bf16.mxu0 %v2372
  %4224 = vmatmul.mubr.bf16.gmra.mrb[0].mxu0 %v2371
  %v4225 = vpop.f32.mrb[0].mxu0
  %v4226 = vadd.f32 %v3681, %v4225
  %v4227 = vpop.f32.mrb[0].mxu0
  %v4228 = vpop.f32.mrb[0].mxu0
  %v4229 = vadd.f32 %v3684, %v4228
  %v4230 = vpop.f32.mrb[0].mxu0
  %4231 = vmatprep.mubr.bf16.mxu0 %v2379
  %4232 = vmatmul.mubr.bf16.gmra.mrb[0].mxu0 %v2378
  %v4233 = vpop.f32.mrb[0].mxu0
  %v4234 = vadd.f32 %v3689, %v4233
  %v4235 = vpop.f32.mrb[0].mxu0
  %v4236 = vpop.f32.mrb[0].mxu0
  %v4237 = vadd.f32 %v3692, %v4236
  %v4238 = vpop.f32.mrb[0].mxu0
  %4239 = vmatprep.mubr.bf16.mxu0 %v2386
  %4240 = vmatmul.mubr.bf16.gmra.mrb[0].mxu0 %v2385
  %v4241 = vpop.f32.mrb[0].mxu0
  %v4242 = vadd.f32 %v3697, %v4241
  %v4243 = vpop.f32.mrb[0].mxu0
  %v4244 = vpop.f32.mrb[0].mxu0
  %v4245 = vadd.f32 %v3700, %v4244
  %v4246 = vpop.f32.mrb[0].mxu0
  %4247 = vmatprep.mubr.bf16.mxu0 %v2393
  %4248 = vmatmul.mubr.bf16.gmra.mrb[0].mxu0 %v2392
  %v4249 = vpop.f32.mrb[0].mxu0
  %v4250 = vadd.f32 %v3705, %v4249
  %v4251 = vpop.f32.mrb[0].mxu0
  %v4252 = vpop.f32.mrb[0].mxu0
  %v4253 = vadd.f32 %v3708, %v4252
  %v4254 = vpop.f32.mrb[0].mxu0
  %4255 = vmatprep.mubr.bf16.mxu0 %v2400
  %4256 = vmatmul.mubr.bf16.gmra.mrb[0].mxu0 %v2399
  %v4257 = vpop.f32.mrb[0].mxu0
  %v4258 = vadd.f32 %v3713, %v4257
  %v4259 = vpop.f32.mrb[0].mxu0
  %v4260 = vpop.f32.mrb[0].mxu0
  %v4261 = vadd.f32 %v3716, %v4260
  %v4262 = vpop.f32.mrb[0].mxu0
  %4263 = vmatprep.mubr.bf16.mxu0 %v2407
  %4264 = vmatmul.mubr.bf16.gmra.mrb[0].mxu0 %v2406
  %v4265 = vpop.f32.mrb[0].mxu0
  %v4266 = vadd.f32 %v3721, %v4265
  %v4267 = vpop.f32.mrb[0].mxu0
  %v4268 = vpop.f32.mrb[0].mxu0
  %v4269 = vadd.f32 %v3724, %v4268
  %v4270 = vpop.f32.mrb[0].mxu0
  %4271 = vmatprep.mubr.bf16.mxu0 %v2414
  %4272 = vmatmul.mubr.bf16.gmra.mrb[0].mxu0 %v2413
  %v4273 = vpop.f32.mrb[0].mxu0
  %v4274 = vadd.f32 %v3729, %v4273
  %v4275 = vpop.f32.mrb[0].mxu0
  %v4276 = vpop.f32.mrb[0].mxu0
  %v4277 = vadd.f32 %v3732, %v4276
  %v4278 = vpop.f32.mrb[0].mxu0
  %4279 = vmatprep.mubr.bf16.mxu0 %v2421
  %4280 = vmatmul.mubr.bf16.gmra.mrb[0].mxu0 %v2420
  %v4281 = vpop.f32.mrb[0].mxu0
  %v4282 = vadd.f32 %v3737, %v4281
  %v4283 = vpop.f32.mrb[0].mxu0
  %v4284 = vpop.f32.mrb[0].mxu0
  %v4285 = vadd.f32 %v3740, %v4284
  %v4286 = vpop.f32.mrb[0].mxu0
  %4287 = vmatprep.mubr.bf16.mxu0 %v2428
  %4288 = vmatmul.mubr.bf16.gmra.mrb[0].mxu0 %v2427
  %v4289 = vpop.f32.mrb[0].mxu0
  %v4290 = vadd.f32 %v3745, %v4289
  %v4291 = vpop.f32.mrb[0].mxu0
  %v4292 = vpop.f32.mrb[0].mxu0
  %v4293 = vadd.f32 %v3748, %v4292
  %v4294 = vpop.f32.mrb[0].mxu0
  %4295 = vmatprep.mubr.bf16.mxu0 %v2435
  %4296 = vmatmul.mubr.bf16.gmra.mrb[0].mxu0 %v2434
  %v4297 = vpop.f32.mrb[0].mxu0
  %v4298 = vadd.f32 %v3753, %v4297
  %v4299 = vpop.f32.mrb[0].mxu0
  %v4300 = vpop.f32.mrb[0].mxu0
  %v4301 = vadd.f32 %v3756, %v4300
  %v4302 = vpop.f32.mrb[0].mxu0
  %4303 = vmatprep.mubr.bf16.mxu0 %v2442
  %4304 = vmatmul.mubr.bf16.gmra.mrb[0].mxu0 %v2441
  %v4305 = vpop.f32.mrb[0].mxu0
  %v4306 = vadd.f32 %v3761, %v4305
  %v4307 = vpop.f32.mrb[0].mxu0
  %v4308 = vpop.f32.mrb[0].mxu0
  %v4309 = vadd.f32 %v3764, %v4308
  %v4310 = vpop.f32.mrb[0].mxu0
  %4311 = vmatprep.mubr.bf16.mxu0 %v2449
  %4312 = vmatmul.mubr.bf16.gmra.mrb[0].mxu0 %v2448
  %v4313 = vpop.f32.mrb[0].mxu0
  %v4314 = vadd.f32 %v3769, %v4313
  %v4315 = vpop.f32.mrb[0].mxu0
  %v4316 = vpop.f32.mrb[0].mxu0
  %v4317 = vadd.f32 %v3772, %v4316
  %v4318 = vpop.f32.mrb[0].mxu0
  %4319 = vmatprep.mubr.bf16.mxu0 %v2456
  %4320 = vmatmul.mubr.bf16.gmra.mrb[0].mxu0 %v2455
  %v4321 = vpop.f32.mrb[0].mxu0
  %v4322 = vadd.f32 %v3777, %v4321
  %v4323 = vpop.f32.mrb[0].mxu0
  %v4324 = vpop.f32.mrb[0].mxu0
  %v4325 = vadd.f32 %v3780, %v4324
  %v4326 = vpop.f32.mrb[0].mxu0
  %4327 = vmatprep.mubr.bf16.mxu0 %v2463
  %4328 = vmatmul.mubr.bf16.gmra.mrb[0].mxu0 %v2462
  %v4329 = vpop.f32.mrb[0].mxu0
  %v4330 = vadd.f32 %v3785, %v4329
  %v4331 = vpop.f32.mrb[0].mxu0
  %v4332 = vpop.f32.mrb[0].mxu0
  %v4333 = vadd.f32 %v3788, %v4332
  %v4334 = vpop.f32.mrb[0].mxu0
  %4335 = vmatprep.mubr.bf16.mxu0 %v2470
  %4336 = vmatmul.mubr.bf16.gmra.mrb[0].mxu0 %v2469
  %v4337 = vpop.f32.mrb[0].mxu0
  %v4338 = vadd.f32 %v3793, %v4337
  %v4339 = vpop.f32.mrb[0].mxu0
  %v4340 = vpop.f32.mrb[0].mxu0
  %v4341 = vadd.f32 %v3796, %v4340
  %v4342 = vpop.f32.mrb[0].mxu0
  %4343 = vmatprep.mubr.bf16.mxu0 %v2477
  %4344 = vmatmul.mubr.bf16.gmra.mrb[0].mxu0 %v2476
  %v4345 = vpop.f32.mrb[0].mxu0
  %v4346 = vadd.f32 %v3801, %v4345
  %v4347 = vpop.f32.mrb[0].mxu0
  %v4348 = vpop.f32.mrb[0].mxu0
  %v4349 = vadd.f32 %v3804, %v4348
  %v4350 = vpop.f32.mrb[0].mxu0
  %4351 = vmatprep.mubr.bf16.mxu0 %v2484
  %4352 = vmatmul.mubr.bf16.gmra.mrb[0].mxu0 %v2483
  %v4353 = vpop.f32.mrb[0].mxu0
  %v4354 = vadd.f32 %v3809, %v4353
  %v4355 = vpop.f32.mrb[0].mxu0
  %v4356 = vpop.f32.mrb[0].mxu0
  %v4357 = vadd.f32 %v3812, %v4356
  %v4358 = vpop.f32.mrb[0].mxu0
  %4359 = vmatprep.mubr.bf16.mxu0 %v2491
  %4360 = vmatmul.mubr.bf16.gmra.mrb[0].mxu0 %v2490
  %v4361 = vpop.f32.mrb[0].mxu0
  %v4362 = vadd.f32 %v3817, %v4361
  %v4363 = vpop.f32.mrb[0].mxu0
  %v4364 = vpop.f32.mrb[0].mxu0
  %v4365 = vadd.f32 %v3820, %v4364
  %v4366 = vpop.f32.mrb[0].mxu0
  %4367 = vmatprep.mubr.bf16.mxu0 %v2498
  %4368 = vmatmul.mubr.bf16.gmra.mrb[0].mxu0 %v2497
  %v4369 = vpop.f32.mrb[0].mxu0
  %v4370 = vadd.f32 %v3825, %v4369
  %v4371 = vpop.f32.mrb[0].mxu0
  %v4372 = vpop.f32.mrb[0].mxu0
  %v4373 = vadd.f32 %v3828, %v4372
  %v4374 = vpop.f32.mrb[0].mxu0
  %4375 = vdwg.mxu0
  %4376 = vmatprep.subr.bf16.mxu0 0
  %4377 = vmatpush1.bf16.msra.mxu0 %v3206
  %4378 = vmatprep.subr.bf16.mxu0 0
  %4379 = vmatpush1.bf16.msra.mxu0 %v3207
  %4380 = vmatprep.subr.bf16.mxu0 0
  %4381 = vmatpush1.bf16.msra.mxu0 %v3208
  %4382 = vmatprep.subr.bf16.mxu0 0
  %4383 = vmatpush1.bf16.msra.mxu0 %v3209
  %4384 = vmatprep.subr.bf16.mxu0 0
  %4385 = vmatpush1.bf16.msra.mxu0 %v3210
  %4386 = vmatprep.subr.bf16.mxu0 0
  %4387 = vmatpush1.bf16.msra.mxu0 %v3211
  %4388 = vmatprep.subr.bf16.mxu0 0
  %4389 = vmatpush1.bf16.msra.mxu0 %v3212
  %4390 = vmatprep.subr.bf16.mxu0 0
  %4391 = vmatpush1.bf16.msra.mxu0 %v3213
  %4392 = vmatprep.subr.bf16.mxu0 0
  %4393 = vmatpush1.bf16.msra.mxu0 %v3214
  %4394 = vmatprep.subr.bf16.mxu0 0
  %4395 = vmatpush1.bf16.msra.mxu0 %v3215
  %4396 = vmatprep.subr.bf16.mxu0 0
  %4397 = vmatpush1.bf16.msra.mxu0 %v3216
  %4398 = vmatprep.subr.bf16.mxu0 0
  %4399 = vmatpush1.bf16.msra.mxu0 %v3217
  %4400 = vmatprep.subr.bf16.mxu0 0
  %4401 = vmatpush1.bf16.msra.mxu0 %v3218
  %4402 = vmatprep.subr.bf16.mxu0 0
  %4403 = vmatpush1.bf16.msra.mxu0 %v3219
  %4404 = vmatprep.subr.bf16.mxu0 0
  %4405 = vmatpush1.bf16.msra.mxu0 %v3220
  %4406 = vmatprep.subr.bf16.mxu0 0
  %4407 = vmatpush1.bf16.msra.mxu0 %v3221
  %4408 = vmatprep.mubr.bf16.mxu0 %v2059
  %4409 = vmatmul.mubr.bf16.gmra.mrb[0].mxu0 %v2058
  %v4410 = vpop.f32.mrb[0].mxu0
  %v4411 = vadd.f32 %v3866, %v4410
  %v4412 = vpop.f32.mrb[0].mxu0
  %v4413 = vpop.f32.mrb[0].mxu0
  %v4414 = vadd.f32 %v3869, %v4413
  %v4415 = vpop.f32.mrb[0].mxu0
  %4416 = vmatprep.mubr.bf16.mxu0 %v2066
  %4417 = vmatmul.mubr.bf16.gmra.mrb[0].mxu0 %v2065
  %v4418 = vpop.f32.mrb[0].mxu0
  %v4419 = vadd.f32 %v3874, %v4418
  %v4420 = vpop.f32.mrb[0].mxu0
  %v4421 = vpop.f32.mrb[0].mxu0
  %v4422 = vadd.f32 %v3877, %v4421
  %v4423 = vpop.f32.mrb[0].mxu0
  %4424 = vmatprep.mubr.bf16.mxu0 %v2073
  %4425 = vmatmul.mubr.bf16.gmra.mrb[0].mxu0 %v2072
  %v4426 = vpop.f32.mrb[0].mxu0
  %v4427 = vadd.f32 %v3882, %v4426
  %v4428 = vpop.f32.mrb[0].mxu0
  %v4429 = vpop.f32.mrb[0].mxu0
  %v4430 = vadd.f32 %v3885, %v4429
  %v4431 = vpop.f32.mrb[0].mxu0
  %4432 = vmatprep.mubr.bf16.mxu0 %v2080
  %4433 = vmatmul.mubr.bf16.gmra.mrb[0].mxu0 %v2079
  %v4434 = vpop.f32.mrb[0].mxu0
  %v4435 = vadd.f32 %v3890, %v4434
  %v4436 = vpop.f32.mrb[0].mxu0
  %v4437 = vpop.f32.mrb[0].mxu0
  %v4438 = vadd.f32 %v3893, %v4437
  %v4439 = vpop.f32.mrb[0].mxu0
  %4440 = vmatprep.mubr.bf16.mxu0 %v2087
  %4441 = vmatmul.mubr.bf16.gmra.mrb[0].mxu0 %v2086
  %v4442 = vpop.f32.mrb[0].mxu0
  %v4443 = vadd.f32 %v3898, %v4442
  %v4444 = vpop.f32.mrb[0].mxu0
  %v4445 = vpop.f32.mrb[0].mxu0
  %v4446 = vadd.f32 %v3901, %v4445
  %v4447 = vpop.f32.mrb[0].mxu0
  %4448 = vmatprep.mubr.bf16.mxu0 %v2094
  %4449 = vmatmul.mubr.bf16.gmra.mrb[0].mxu0 %v2093
  %v4450 = vpop.f32.mrb[0].mxu0
  %v4451 = vadd.f32 %v3906, %v4450
  %v4452 = vpop.f32.mrb[0].mxu0
  %v4453 = vpop.f32.mrb[0].mxu0
  %v4454 = vadd.f32 %v3909, %v4453
  %v4455 = vpop.f32.mrb[0].mxu0
  %4456 = vmatprep.mubr.bf16.mxu0 %v2101
  %4457 = vmatmul.mubr.bf16.gmra.mrb[0].mxu0 %v2100
  %v4458 = vpop.f32.mrb[0].mxu0
  %v4459 = vadd.f32 %v3914, %v4458
  %v4460 = vpop.f32.mrb[0].mxu0
  %v4461 = vpop.f32.mrb[0].mxu0
  %v4462 = vadd.f32 %v3917, %v4461
  %v4463 = vpop.f32.mrb[0].mxu0
  %4464 = vmatprep.mubr.bf16.mxu0 %v2108
  %4465 = vmatmul.mubr.bf16.gmra.mrb[0].mxu0 %v2107
  %v4466 = vpop.f32.mrb[0].mxu0
  %v4467 = vadd.f32 %v3922, %v4466
  %v4468 = vpop.f32.mrb[0].mxu0
  %v4469 = vpop.f32.mrb[0].mxu0
  %v4470 = vadd.f32 %v3925, %v4469
  %v4471 = vpop.f32.mrb[0].mxu0
  %4472 = vmatprep.mubr.bf16.mxu0 %v2115
  %4473 = vmatmul.mubr.bf16.gmra.mrb[0].mxu0 %v2114
  %v4474 = vpop.f32.mrb[0].mxu0
  %v4475 = vadd.f32 %v3930, %v4474
  %v4476 = vpop.f32.mrb[0].mxu0
  %v4477 = vpop.f32.mrb[0].mxu0
  %v4478 = vadd.f32 %v3933, %v4477
  %v4479 = vpop.f32.mrb[0].mxu0
  %4480 = vmatprep.mubr.bf16.mxu0 %v2122
  %4481 = vmatmul.mubr.bf16.gmra.mrb[0].mxu0 %v2121
  %v4482 = vpop.f32.mrb[0].mxu0
  %v4483 = vadd.f32 %v3938, %v4482
  %v4484 = vpop.f32.mrb[0].mxu0
  %v4485 = vpop.f32.mrb[0].mxu0
  %v4486 = vadd.f32 %v3941, %v4485
  %v4487 = vpop.f32.mrb[0].mxu0
  %4488 = vmatprep.mubr.bf16.mxu0 %v2129
  %4489 = vmatmul.mubr.bf16.gmra.mrb[0].mxu0 %v2128
  %v4490 = vpop.f32.mrb[0].mxu0
  %v4491 = vadd.f32 %v3946, %v4490
  %v4492 = vpop.f32.mrb[0].mxu0
  %v4493 = vpop.f32.mrb[0].mxu0
  %v4494 = vadd.f32 %v3949, %v4493
  %v4495 = vpop.f32.mrb[0].mxu0
  %4496 = vmatprep.mubr.bf16.mxu0 %v2136
  %4497 = vmatmul.mubr.bf16.gmra.mrb[0].mxu0 %v2135
  %v4498 = vpop.f32.mrb[0].mxu0
  %v4499 = vadd.f32 %v3954, %v4498
  %v4500 = vpop.f32.mrb[0].mxu0
  %v4501 = vpop.f32.mrb[0].mxu0
  %v4502 = vadd.f32 %v3957, %v4501
  %v4503 = vpop.f32.mrb[0].mxu0
  %4504 = vmatprep.mubr.bf16.mxu0 %v2143
  %4505 = vmatmul.mubr.bf16.gmra.mrb[0].mxu0 %v2142
  %v4506 = vpop.f32.mrb[0].mxu0
  %v4507 = vadd.f32 %v3962, %v4506
  %v4508 = vpop.f32.mrb[0].mxu0
  %v4509 = vpop.f32.mrb[0].mxu0
  %v4510 = vadd.f32 %v3965, %v4509
  %v4511 = vpop.f32.mrb[0].mxu0
  %4512 = vmatprep.mubr.bf16.mxu0 %v2150
  %4513 = vmatmul.mubr.bf16.gmra.mrb[0].mxu0 %v2149
  %v4514 = vpop.f32.mrb[0].mxu0
  %v4515 = vadd.f32 %v3970, %v4514
  %v4516 = vpop.f32.mrb[0].mxu0
  %v4517 = vpop.f32.mrb[0].mxu0
  %v4518 = vadd.f32 %v3973, %v4517
  %v4519 = vpop.f32.mrb[0].mxu0
  %4520 = vmatprep.mubr.bf16.mxu0 %v2157
  %4521 = vmatmul.mubr.bf16.gmra.mrb[0].mxu0 %v2156
  %v4522 = vpop.f32.mrb[0].mxu0
  %v4523 = vadd.f32 %v3978, %v4522
  %v4524 = vpop.f32.mrb[0].mxu0
  %v4525 = vpop.f32.mrb[0].mxu0
  %v4526 = vadd.f32 %v3981, %v4525
  %v4527 = vpop.f32.mrb[0].mxu0
  %4528 = vmatprep.mubr.bf16.mxu0 %v2164
  %4529 = vmatmul.mubr.bf16.gmra.mrb[0].mxu0 %v2163
  %v4530 = vpop.f32.mrb[0].mxu0
  %v4531 = vadd.f32 %v3986, %v4530
  %v4532 = vpop.f32.mrb[0].mxu0
  %v4533 = vpop.f32.mrb[0].mxu0
  %v4534 = vadd.f32 %v3989, %v4533
  %v4535 = vpop.f32.mrb[0].mxu0
  %4536 = vmatprep.mubr.bf16.mxu0 %v2171
  %4537 = vmatmul.mubr.bf16.gmra.mrb[0].mxu0 %v2170
  %v4538 = vpop.f32.mrb[0].mxu0
  %v4539 = vadd.f32 %v3994, %v4538
  %v4540 = vpop.f32.mrb[0].mxu0
  %v4541 = vpop.f32.mrb[0].mxu0
  %v4542 = vadd.f32 %v3997, %v4541
  %v4543 = vpop.f32.mrb[0].mxu0
  %4544 = vmatprep.mubr.bf16.mxu0 %v2178
  %4545 = vmatmul.mubr.bf16.gmra.mrb[0].mxu0 %v2177
  %v4546 = vpop.f32.mrb[0].mxu0
  %v4547 = vadd.f32 %v4002, %v4546
  %v4548 = vpop.f32.mrb[0].mxu0
  %v4549 = vpop.f32.mrb[0].mxu0
  %v4550 = vadd.f32 %v4005, %v4549
  %v4551 = vpop.f32.mrb[0].mxu0
  %4552 = vmatprep.mubr.bf16.mxu0 %v2185
  %4553 = vmatmul.mubr.bf16.gmra.mrb[0].mxu0 %v2184
  %v4554 = vpop.f32.mrb[0].mxu0
  %v4555 = vadd.f32 %v4010, %v4554
  %v4556 = vpop.f32.mrb[0].mxu0
  %v4557 = vpop.f32.mrb[0].mxu0
  %v4558 = vadd.f32 %v4013, %v4557
  %v4559 = vpop.f32.mrb[0].mxu0
  %4560 = vmatprep.mubr.bf16.mxu0 %v2192
  %4561 = vmatmul.mubr.bf16.gmra.mrb[0].mxu0 %v2191
  %v4562 = vpop.f32.mrb[0].mxu0
  %v4563 = vadd.f32 %v4018, %v4562
  %v4564 = vpop.f32.mrb[0].mxu0
  %v4565 = vpop.f32.mrb[0].mxu0
  %v4566 = vadd.f32 %v4021, %v4565
  %v4567 = vpop.f32.mrb[0].mxu0
  %4568 = vmatprep.mubr.bf16.mxu0 %v2199
  %4569 = vmatmul.mubr.bf16.gmra.mrb[0].mxu0 %v2198
  %v4570 = vpop.f32.mrb[0].mxu0
  %v4571 = vadd.f32 %v4026, %v4570
  %v4572 = vpop.f32.mrb[0].mxu0
  %v4573 = vpop.f32.mrb[0].mxu0
  %v4574 = vadd.f32 %v4029, %v4573
  %v4575 = vpop.f32.mrb[0].mxu0
  %4576 = vmatprep.mubr.bf16.mxu0 %v2206
  %4577 = vmatmul.mubr.bf16.gmra.mrb[0].mxu0 %v2205
  %v4578 = vpop.f32.mrb[0].mxu0
  %v4579 = vadd.f32 %v4034, %v4578
  %v4580 = vpop.f32.mrb[0].mxu0
  %v4581 = vpop.f32.mrb[0].mxu0
  %v4582 = vadd.f32 %v4037, %v4581
  %v4583 = vpop.f32.mrb[0].mxu0
  %4584 = vmatprep.mubr.bf16.mxu0 %v2213
  %4585 = vmatmul.mubr.bf16.gmra.mrb[0].mxu0 %v2212
  %v4586 = vpop.f32.mrb[0].mxu0
  %v4587 = vadd.f32 %v4042, %v4586
  %v4588 = vpop.f32.mrb[0].mxu0
  %v4589 = vpop.f32.mrb[0].mxu0
  %v4590 = vadd.f32 %v4045, %v4589
  %v4591 = vpop.f32.mrb[0].mxu0
  %4592 = vmatprep.mubr.bf16.mxu0 %v2220
  %4593 = vmatmul.mubr.bf16.gmra.mrb[0].mxu0 %v2219
  %v4594 = vpop.f32.mrb[0].mxu0
  %v4595 = vadd.f32 %v4050, %v4594
  %v4596 = vpop.f32.mrb[0].mxu0
  %v4597 = vpop.f32.mrb[0].mxu0
  %v4598 = vadd.f32 %v4053, %v4597
  %v4599 = vpop.f32.mrb[0].mxu0
  %4600 = vmatprep.mubr.bf16.mxu0 %v2227
  %4601 = vmatmul.mubr.bf16.gmra.mrb[0].mxu0 %v2226
  %v4602 = vpop.f32.mrb[0].mxu0
  %v4603 = vadd.f32 %v4058, %v4602
  %v4604 = vpop.f32.mrb[0].mxu0
  %v4605 = vpop.f32.mrb[0].mxu0
  %v4606 = vadd.f32 %v4061, %v4605
  %v4607 = vpop.f32.mrb[0].mxu0
  %4608 = vmatprep.mubr.bf16.mxu0 %v2234
  %4609 = vmatmul.mubr.bf16.gmra.mrb[0].mxu0 %v2233
  %v4610 = vpop.f32.mrb[0].mxu0
  %v4611 = vadd.f32 %v4066, %v4610
  %v4612 = vpop.f32.mrb[0].mxu0
  %v4613 = vpop.f32.mrb[0].mxu0
  %v4614 = vadd.f32 %v4069, %v4613
  %v4615 = vpop.f32.mrb[0].mxu0
  %4616 = vmatprep.mubr.bf16.mxu0 %v2241
  %4617 = vmatmul.mubr.bf16.gmra.mrb[0].mxu0 %v2240
  %v4618 = vpop.f32.mrb[0].mxu0
  %v4619 = vadd.f32 %v4074, %v4618
  %v4620 = vpop.f32.mrb[0].mxu0
  %v4621 = vpop.f32.mrb[0].mxu0
  %v4622 = vadd.f32 %v4077, %v4621
  %v4623 = vpop.f32.mrb[0].mxu0
  %4624 = vmatprep.mubr.bf16.mxu0 %v2248
  %4625 = vmatmul.mubr.bf16.gmra.mrb[0].mxu0 %v2247
  %v4626 = vpop.f32.mrb[0].mxu0
  %v4627 = vadd.f32 %v4082, %v4626
  %v4628 = vpop.f32.mrb[0].mxu0
  %v4629 = vpop.f32.mrb[0].mxu0
  %v4630 = vadd.f32 %v4085, %v4629
  %v4631 = vpop.f32.mrb[0].mxu0
  %4632 = vmatprep.mubr.bf16.mxu0 %v2255
  %4633 = vmatmul.mubr.bf16.gmra.mrb[0].mxu0 %v2254
  %v4634 = vpop.f32.mrb[0].mxu0
  %v4635 = vadd.f32 %v4090, %v4634
  %v4636 = vpop.f32.mrb[0].mxu0
  %v4637 = vpop.f32.mrb[0].mxu0
  %v4638 = vadd.f32 %v4093, %v4637
  %v4639 = vpop.f32.mrb[0].mxu0
  %4640 = vmatprep.mubr.bf16.mxu0 %v2262
  %4641 = vmatmul.mubr.bf16.gmra.mrb[0].mxu0 %v2261
  %v4642 = vpop.f32.mrb[0].mxu0
  %v4643 = vadd.f32 %v4098, %v4642
  %v4644 = vpop.f32.mrb[0].mxu0
  %v4645 = vpop.f32.mrb[0].mxu0
  %v4646 = vadd.f32 %v4101, %v4645
  %v4647 = vpop.f32.mrb[0].mxu0
  %4648 = vmatprep.mubr.bf16.mxu0 %v2269
  %4649 = vmatmul.mubr.bf16.gmra.mrb[0].mxu0 %v2268
  %v4650 = vpop.f32.mrb[0].mxu0
  %v4651 = vadd.f32 %v4106, %v4650
  %v4652 = vpop.f32.mrb[0].mxu0
  %v4653 = vpop.f32.mrb[0].mxu0
  %v4654 = vadd.f32 %v4109, %v4653
  %v4655 = vpop.f32.mrb[0].mxu0
  %4656 = vmatprep.mubr.bf16.mxu0 %v2276
  %4657 = vmatmul.mubr.bf16.gmra.mrb[0].mxu0 %v2275
  %v4658 = vpop.f32.mrb[0].mxu0
  %v4659 = vadd.f32 %v4114, %v4658
  %v4660 = vpop.f32.mrb[0].mxu0
  %v4661 = vpop.f32.mrb[0].mxu0
  %v4662 = vadd.f32 %v4117, %v4661
  %v4663 = vpop.f32.mrb[0].mxu0
  %4664 = vmatprep.mubr.bf16.mxu0 %v2283
  %4665 = vmatmul.mubr.bf16.gmra.mrb[0].mxu0 %v2282
  %v4666 = vpop.f32.mrb[0].mxu0
  %v4667 = vadd.f32 %v4122, %v4666
  %v4668 = vpop.f32.mrb[0].mxu0
  %v4669 = vpop.f32.mrb[0].mxu0
  %v4670 = vadd.f32 %v4125, %v4669
  %v4671 = vpop.f32.mrb[0].mxu0
  %4672 = vmatprep.mubr.bf16.mxu0 %v2290
  %4673 = vmatmul.mubr.bf16.gmra.mrb[0].mxu0 %v2289
  %v4674 = vpop.f32.mrb[0].mxu0
  %v4675 = vadd.f32 %v4130, %v4674
  %v4676 = vpop.f32.mrb[0].mxu0
  %v4677 = vpop.f32.mrb[0].mxu0
  %v4678 = vadd.f32 %v4133, %v4677
  %v4679 = vpop.f32.mrb[0].mxu0
  %4680 = vmatprep.mubr.bf16.mxu0 %v2297
  %4681 = vmatmul.mubr.bf16.gmra.mrb[0].mxu0 %v2296
  %v4682 = vpop.f32.mrb[0].mxu0
  %v4683 = vadd.f32 %v4138, %v4682
  %v4684 = vpop.f32.mrb[0].mxu0
  %v4685 = vpop.f32.mrb[0].mxu0
  %v4686 = vadd.f32 %v4141, %v4685
  %v4687 = vpop.f32.mrb[0].mxu0
  %4688 = vmatprep.mubr.bf16.mxu0 %v2304
  %4689 = vmatmul.mubr.bf16.gmra.mrb[0].mxu0 %v2303
  %v4690 = vpop.f32.mrb[0].mxu0
  %v4691 = vadd.f32 %v4146, %v4690
  %v4692 = vpop.f32.mrb[0].mxu0
  %v4693 = vpop.f32.mrb[0].mxu0
  %v4694 = vadd.f32 %v4149, %v4693
  %v4695 = vpop.f32.mrb[0].mxu0
  %4696 = vmatprep.mubr.bf16.mxu0 %v2311
  %4697 = vmatmul.mubr.bf16.gmra.mrb[0].mxu0 %v2310
  %v4698 = vpop.f32.mrb[0].mxu0
  %v4699 = vadd.f32 %v4154, %v4698
  %v4700 = vpop.f32.mrb[0].mxu0
  %v4701 = vpop.f32.mrb[0].mxu0
  %v4702 = vadd.f32 %v4157, %v4701
  %v4703 = vpop.f32.mrb[0].mxu0
  %4704 = vmatprep.mubr.bf16.mxu0 %v2318
  %4705 = vmatmul.mubr.bf16.gmra.mrb[0].mxu0 %v2317
  %v4706 = vpop.f32.mrb[0].mxu0
  %v4707 = vadd.f32 %v4162, %v4706
  %v4708 = vpop.f32.mrb[0].mxu0
  %v4709 = vpop.f32.mrb[0].mxu0
  %v4710 = vadd.f32 %v4165, %v4709
  %v4711 = vpop.f32.mrb[0].mxu0
  %4712 = vmatprep.mubr.bf16.mxu0 %v2325
  %4713 = vmatmul.mubr.bf16.gmra.mrb[0].mxu0 %v2324
  %v4714 = vpop.f32.mrb[0].mxu0
  %v4715 = vadd.f32 %v4170, %v4714
  %v4716 = vpop.f32.mrb[0].mxu0
  %v4717 = vpop.f32.mrb[0].mxu0
  %v4718 = vadd.f32 %v4173, %v4717
  %v4719 = vpop.f32.mrb[0].mxu0
  %4720 = vmatprep.mubr.bf16.mxu0 %v2332
  %4721 = vmatmul.mubr.bf16.gmra.mrb[0].mxu0 %v2331
  %v4722 = vpop.f32.mrb[0].mxu0
  %v4723 = vadd.f32 %v4178, %v4722
  %v4724 = vpop.f32.mrb[0].mxu0
  %v4725 = vpop.f32.mrb[0].mxu0
  %v4726 = vadd.f32 %v4181, %v4725
  %v4727 = vpop.f32.mrb[0].mxu0
  %4728 = vmatprep.mubr.bf16.mxu0 %v2339
  %4729 = vmatmul.mubr.bf16.gmra.mrb[0].mxu0 %v2338
  %v4730 = vpop.f32.mrb[0].mxu0
  %v4731 = vadd.f32 %v4186, %v4730
  %v4732 = vpop.f32.mrb[0].mxu0
  %v4733 = vpop.f32.mrb[0].mxu0
  %v4734 = vadd.f32 %v4189, %v4733
  %v4735 = vpop.f32.mrb[0].mxu0
  %4736 = vmatprep.mubr.bf16.mxu0 %v2346
  %4737 = vmatmul.mubr.bf16.gmra.mrb[0].mxu0 %v2345
  %v4738 = vpop.f32.mrb[0].mxu0
  %v4739 = vadd.f32 %v4194, %v4738
  %v4740 = vpop.f32.mrb[0].mxu0
  %v4741 = vpop.f32.mrb[0].mxu0
  %v4742 = vadd.f32 %v4197, %v4741
  %v4743 = vpop.f32.mrb[0].mxu0
  %4744 = vmatprep.mubr.bf16.mxu0 %v2353
  %4745 = vmatmul.mubr.bf16.gmra.mrb[0].mxu0 %v2352
  %v4746 = vpop.f32.mrb[0].mxu0
  %v4747 = vadd.f32 %v4202, %v4746
  %v4748 = vpop.f32.mrb[0].mxu0
  %v4749 = vpop.f32.mrb[0].mxu0
  %v4750 = vadd.f32 %v4205, %v4749
  %v4751 = vpop.f32.mrb[0].mxu0
  %4752 = vmatprep.mubr.bf16.mxu0 %v2360
  %4753 = vmatmul.mubr.bf16.gmra.mrb[0].mxu0 %v2359
  %v4754 = vpop.f32.mrb[0].mxu0
  %v4755 = vadd.f32 %v4210, %v4754
  %v4756 = vpop.f32.mrb[0].mxu0
  %v4757 = vpop.f32.mrb[0].mxu0
  %v4758 = vadd.f32 %v4213, %v4757
  %v4759 = vpop.f32.mrb[0].mxu0
  %4760 = vmatprep.mubr.bf16.mxu0 %v2367
  %4761 = vmatmul.mubr.bf16.gmra.mrb[0].mxu0 %v2366
  %v4762 = vpop.f32.mrb[0].mxu0
  %v4763 = vadd.f32 %v4218, %v4762
  %v4764 = vpop.f32.mrb[0].mxu0
  %v4765 = vpop.f32.mrb[0].mxu0
  %v4766 = vadd.f32 %v4221, %v4765
  %v4767 = vpop.f32.mrb[0].mxu0
  %4768 = vmatprep.mubr.bf16.mxu0 %v2374
  %4769 = vmatmul.mubr.bf16.gmra.mrb[0].mxu0 %v2373
  %v4770 = vpop.f32.mrb[0].mxu0
  %v4771 = vadd.f32 %v4226, %v4770
  %v4772 = vpop.f32.mrb[0].mxu0
  %v4773 = vpop.f32.mrb[0].mxu0
  %v4774 = vadd.f32 %v4229, %v4773
  %v4775 = vpop.f32.mrb[0].mxu0
  %4776 = vmatprep.mubr.bf16.mxu0 %v2381
  %4777 = vmatmul.mubr.bf16.gmra.mrb[0].mxu0 %v2380
  %v4778 = vpop.f32.mrb[0].mxu0
  %v4779 = vadd.f32 %v4234, %v4778
  %v4780 = vpop.f32.mrb[0].mxu0
  %v4781 = vpop.f32.mrb[0].mxu0
  %v4782 = vadd.f32 %v4237, %v4781
  %v4783 = vpop.f32.mrb[0].mxu0
  %4784 = vmatprep.mubr.bf16.mxu0 %v2388
  %4785 = vmatmul.mubr.bf16.gmra.mrb[0].mxu0 %v2387
  %v4786 = vpop.f32.mrb[0].mxu0
  %v4787 = vadd.f32 %v4242, %v4786
  %v4788 = vpop.f32.mrb[0].mxu0
  %v4789 = vpop.f32.mrb[0].mxu0
  %v4790 = vadd.f32 %v4245, %v4789
  %v4791 = vpop.f32.mrb[0].mxu0
  %4792 = vmatprep.mubr.bf16.mxu0 %v2395
  %4793 = vmatmul.mubr.bf16.gmra.mrb[0].mxu0 %v2394
  %v4794 = vpop.f32.mrb[0].mxu0
  %v4795 = vadd.f32 %v4250, %v4794
  %v4796 = vpop.f32.mrb[0].mxu0
  %v4797 = vpop.f32.mrb[0].mxu0
  %v4798 = vadd.f32 %v4253, %v4797
  %v4799 = vpop.f32.mrb[0].mxu0
  %4800 = vmatprep.mubr.bf16.mxu0 %v2402
  %4801 = vmatmul.mubr.bf16.gmra.mrb[0].mxu0 %v2401
  %v4802 = vpop.f32.mrb[0].mxu0
  %v4803 = vadd.f32 %v4258, %v4802
  %v4804 = vpop.f32.mrb[0].mxu0
  %v4805 = vpop.f32.mrb[0].mxu0
  %v4806 = vadd.f32 %v4261, %v4805
  %v4807 = vpop.f32.mrb[0].mxu0
  %4808 = vmatprep.mubr.bf16.mxu0 %v2409
  %4809 = vmatmul.mubr.bf16.gmra.mrb[0].mxu0 %v2408
  %v4810 = vpop.f32.mrb[0].mxu0
  %v4811 = vadd.f32 %v4266, %v4810
  %v4812 = vpop.f32.mrb[0].mxu0
  %v4813 = vpop.f32.mrb[0].mxu0
  %v4814 = vadd.f32 %v4269, %v4813
  %v4815 = vpop.f32.mrb[0].mxu0
  %4816 = vmatprep.mubr.bf16.mxu0 %v2416
  %4817 = vmatmul.mubr.bf16.gmra.mrb[0].mxu0 %v2415
  %v4818 = vpop.f32.mrb[0].mxu0
  %v4819 = vadd.f32 %v4274, %v4818
  %v4820 = vpop.f32.mrb[0].mxu0
  %v4821 = vpop.f32.mrb[0].mxu0
  %v4822 = vadd.f32 %v4277, %v4821
  %v4823 = vpop.f32.mrb[0].mxu0
  %4824 = vmatprep.mubr.bf16.mxu0 %v2423
  %4825 = vmatmul.mubr.bf16.gmra.mrb[0].mxu0 %v2422
  %v4826 = vpop.f32.mrb[0].mxu0
  %v4827 = vadd.f32 %v4282, %v4826
  %v4828 = vpop.f32.mrb[0].mxu0
  %v4829 = vpop.f32.mrb[0].mxu0
  %v4830 = vadd.f32 %v4285, %v4829
  %v4831 = vpop.f32.mrb[0].mxu0
  %4832 = vmatprep.mubr.bf16.mxu0 %v2430
  %4833 = vmatmul.mubr.bf16.gmra.mrb[0].mxu0 %v2429
  %v4834 = vpop.f32.mrb[0].mxu0
  %v4835 = vadd.f32 %v4290, %v4834
  %v4836 = vpop.f32.mrb[0].mxu0
  %v4837 = vpop.f32.mrb[0].mxu0
  %v4838 = vadd.f32 %v4293, %v4837
  %v4839 = vpop.f32.mrb[0].mxu0
  %4840 = vmatprep.mubr.bf16.mxu0 %v2437
  %4841 = vmatmul.mubr.bf16.gmra.mrb[0].mxu0 %v2436
  %v4842 = vpop.f32.mrb[0].mxu0
  %v4843 = vadd.f32 %v4298, %v4842
  %v4844 = vpop.f32.mrb[0].mxu0
  %v4845 = vpop.f32.mrb[0].mxu0
  %v4846 = vadd.f32 %v4301, %v4845
  %v4847 = vpop.f32.mrb[0].mxu0
  %4848 = vmatprep.mubr.bf16.mxu0 %v2444
  %4849 = vmatmul.mubr.bf16.gmra.mrb[0].mxu0 %v2443
  %v4850 = vpop.f32.mrb[0].mxu0
  %v4851 = vadd.f32 %v4306, %v4850
  %v4852 = vpop.f32.mrb[0].mxu0
  %v4853 = vpop.f32.mrb[0].mxu0
  %v4854 = vadd.f32 %v4309, %v4853
  %v4855 = vpop.f32.mrb[0].mxu0
  %4856 = vmatprep.mubr.bf16.mxu0 %v2451
  %4857 = vmatmul.mubr.bf16.gmra.mrb[0].mxu0 %v2450
  %v4858 = vpop.f32.mrb[0].mxu0
  %v4859 = vadd.f32 %v4314, %v4858
  %v4860 = vpop.f32.mrb[0].mxu0
  %v4861 = vpop.f32.mrb[0].mxu0
  %v4862 = vadd.f32 %v4317, %v4861
  %v4863 = vpop.f32.mrb[0].mxu0
  %4864 = vmatprep.mubr.bf16.mxu0 %v2458
  %4865 = vmatmul.mubr.bf16.gmra.mrb[0].mxu0 %v2457
  %v4866 = vpop.f32.mrb[0].mxu0
  %v4867 = vadd.f32 %v4322, %v4866
  %v4868 = vpop.f32.mrb[0].mxu0
  %v4869 = vpop.f32.mrb[0].mxu0
  %v4870 = vadd.f32 %v4325, %v4869
  %v4871 = vpop.f32.mrb[0].mxu0
  %4872 = vmatprep.mubr.bf16.mxu0 %v2465
  %4873 = vmatmul.mubr.bf16.gmra.mrb[0].mxu0 %v2464
  %v4874 = vpop.f32.mrb[0].mxu0
  %v4875 = vadd.f32 %v4330, %v4874
  %v4876 = vpop.f32.mrb[0].mxu0
  %v4877 = vpop.f32.mrb[0].mxu0
  %v4878 = vadd.f32 %v4333, %v4877
  %v4879 = vpop.f32.mrb[0].mxu0
  %4880 = vmatprep.mubr.bf16.mxu0 %v2472
  %4881 = vmatmul.mubr.bf16.gmra.mrb[0].mxu0 %v2471
  %v4882 = vpop.f32.mrb[0].mxu0
  %v4883 = vadd.f32 %v4338, %v4882
  %v4884 = vpop.f32.mrb[0].mxu0
  %v4885 = vpop.f32.mrb[0].mxu0
  %v4886 = vadd.f32 %v4341, %v4885
  %v4887 = vpop.f32.mrb[0].mxu0
  %4888 = vmatprep.mubr.bf16.mxu0 %v2479
  %4889 = vmatmul.mubr.bf16.gmra.mrb[0].mxu0 %v2478
  %v4890 = vpop.f32.mrb[0].mxu0
  %v4891 = vadd.f32 %v4346, %v4890
  %v4892 = vpop.f32.mrb[0].mxu0
  %v4893 = vpop.f32.mrb[0].mxu0
  %v4894 = vadd.f32 %v4349, %v4893
  %v4895 = vpop.f32.mrb[0].mxu0
  %4896 = vmatprep.mubr.bf16.mxu0 %v2486
  %4897 = vmatmul.mubr.bf16.gmra.mrb[0].mxu0 %v2485
  %v4898 = vpop.f32.mrb[0].mxu0
  %v4899 = vadd.f32 %v4354, %v4898
  %v4900 = vpop.f32.mrb[0].mxu0
  %v4901 = vpop.f32.mrb[0].mxu0
  %v4902 = vadd.f32 %v4357, %v4901
  %v4903 = vpop.f32.mrb[0].mxu0
  %4904 = vmatprep.mubr.bf16.mxu0 %v2493
  %4905 = vmatmul.mubr.bf16.gmra.mrb[0].mxu0 %v2492
  %v4906 = vpop.f32.mrb[0].mxu0
  %v4907 = vadd.f32 %v4362, %v4906
  %v4908 = vpop.f32.mrb[0].mxu0
  %v4909 = vpop.f32.mrb[0].mxu0
  %v4910 = vadd.f32 %v4365, %v4909
  %v4911 = vpop.f32.mrb[0].mxu0
  %4912 = vmatprep.mubr.bf16.mxu0 %v2500
  %4913 = vmatmul.mubr.bf16.gmra.mrb[0].mxu0 %v2499
  %v4914 = vpop.f32.mrb[0].mxu0
  %v4915 = vadd.f32 %v4370, %v4914
  %v4916 = vpop.f32.mrb[0].mxu0
  %v4917 = vpop.f32.mrb[0].mxu0
  %v4918 = vadd.f32 %v4373, %v4917
  %v4919 = vpop.f32.mrb[0].mxu0
  %4920 = vdwg.mxu0
  %4921 = vmatprep.subr.bf16.mxu0 0
  %4922 = vmatpush1.bf16.msra.mxu0 %v3222
  %4923 = vmatprep.subr.bf16.mxu0 0
  %4924 = vmatpush1.bf16.msra.mxu0 %v3223
  %4925 = vmatprep.subr.bf16.mxu0 0
  %4926 = vmatpush1.bf16.msra.mxu0 %v3224
  %4927 = vmatprep.subr.bf16.mxu0 0
  %4928 = vmatpush1.bf16.msra.mxu0 %v3225
  %4929 = vmatprep.subr.bf16.mxu0 0
  %4930 = vmatpush1.bf16.msra.mxu0 %v3226
  %4931 = vmatprep.subr.bf16.mxu0 0
  %4932 = vmatpush1.bf16.msra.mxu0 %v3227
  %4933 = vmatprep.subr.bf16.mxu0 0
  %4934 = vmatpush1.bf16.msra.mxu0 %v3228
  %4935 = vmatprep.subr.bf16.mxu0 0
  %4936 = vmatpush1.bf16.msra.mxu0 %v3229
  %4937 = vmatprep.subr.bf16.mxu0 0
  %4938 = vmatpush1.bf16.msra.mxu0 0
  %4939 = vmatprep.subr.bf16.mxu0 0
  %4940 = vmatpush1.bf16.msra.mxu0 0
  %4941 = vmatprep.subr.bf16.mxu0 0
  %4942 = vmatpush1.bf16.msra.mxu0 0
  %4943 = vmatprep.subr.bf16.mxu0 0
  %4944 = vmatpush1.bf16.msra.mxu0 0
  %4945 = vmatprep.subr.bf16.mxu0 0
  %4946 = vmatpush1.bf16.msra.mxu0 0
  %4947 = vmatprep.subr.bf16.mxu0 0
  %4948 = vmatpush1.bf16.msra.mxu0 0
  %4949 = vmatprep.subr.bf16.mxu0 0
  %4950 = vmatpush1.bf16.msra.mxu0 0
  %4951 = vmatprep.subr.bf16.mxu0 0
  %4952 = vmatpush1.bf16.msra.mxu0 0
  %4953 = vmatprep.mubr.bf16.mxu0 0
  %4954 = vmatmul.mubr.bf16.gmra.mrb[0].mxu0 %v2060
  %v4955 = vpop.f32.mrb[0].mxu0
  %v4956 = vadd.f32 %v4411, %v4955
  %v4957 = vpop.f32.mrb[0].mxu0
  %v4958 = vpop.f32.mrb[0].mxu0
  %v4959 = vadd.f32 %v4414, %v4958
  %v4960 = vpop.f32.mrb[0].mxu0
  %4961 = vmatprep.mubr.bf16.mxu0 0
  %4962 = vmatmul.mubr.bf16.gmra.mrb[0].mxu0 %v2067
  %v4963 = vpop.f32.mrb[0].mxu0
  %v4964 = vadd.f32 %v4419, %v4963
  %v4965 = vpop.f32.mrb[0].mxu0
  %v4966 = vpop.f32.mrb[0].mxu0
  %v4967 = vadd.f32 %v4422, %v4966
  %v4968 = vpop.f32.mrb[0].mxu0
  %4969 = vmatprep.mubr.bf16.mxu0 0
  %4970 = vmatmul.mubr.bf16.gmra.mrb[0].mxu0 %v2074
  %v4971 = vpop.f32.mrb[0].mxu0
  %v4972 = vadd.f32 %v4427, %v4971
  %v4973 = vpop.f32.mrb[0].mxu0
  %v4974 = vpop.f32.mrb[0].mxu0
  %v4975 = vadd.f32 %v4430, %v4974
  %v4976 = vpop.f32.mrb[0].mxu0
  %4977 = vmatprep.mubr.bf16.mxu0 0
  %4978 = vmatmul.mubr.bf16.gmra.mrb[0].mxu0 %v2081
  %v4979 = vpop.f32.mrb[0].mxu0
  %v4980 = vadd.f32 %v4435, %v4979
  %v4981 = vpop.f32.mrb[0].mxu0
  %v4982 = vpop.f32.mrb[0].mxu0
  %v4983 = vadd.f32 %v4438, %v4982
  %v4984 = vpop.f32.mrb[0].mxu0
  %4985 = vmatprep.mubr.bf16.mxu0 0
  %4986 = vmatmul.mubr.bf16.gmra.mrb[0].mxu0 %v2088
  %v4987 = vpop.f32.mrb[0].mxu0
  %v4988 = vadd.f32 %v4443, %v4987
  %v4989 = vpop.f32.mrb[0].mxu0
  %v4990 = vpop.f32.mrb[0].mxu0
  %v4991 = vadd.f32 %v4446, %v4990
  %v4992 = vpop.f32.mrb[0].mxu0
  %4993 = vmatprep.mubr.bf16.mxu0 0
  %4994 = vmatmul.mubr.bf16.gmra.mrb[0].mxu0 %v2095
  %v4995 = vpop.f32.mrb[0].mxu0
  %v4996 = vadd.f32 %v4451, %v4995
  %v4997 = vpop.f32.mrb[0].mxu0
  %v4998 = vpop.f32.mrb[0].mxu0
  %v4999 = vadd.f32 %v4454, %v4998
  %v5000 = vpop.f32.mrb[0].mxu0
  %5001 = vmatprep.mubr.bf16.mxu0 0
  %5002 = vmatmul.mubr.bf16.gmra.mrb[0].mxu0 %v2102
  %v5003 = vpop.f32.mrb[0].mxu0
  %v5004 = vadd.f32 %v4459, %v5003
  %v5005 = vpop.f32.mrb[0].mxu0
  %v5006 = vpop.f32.mrb[0].mxu0
  %v5007 = vadd.f32 %v4462, %v5006
  %v5008 = vpop.f32.mrb[0].mxu0
  %5009 = vmatprep.mubr.bf16.mxu0 0
  %5010 = vmatmul.mubr.bf16.gmra.mrb[0].mxu0 %v2109
  %v5011 = vpop.f32.mrb[0].mxu0
  %v5012 = vadd.f32 %v4467, %v5011
  %v5013 = vpop.f32.mrb[0].mxu0
  %v5014 = vpop.f32.mrb[0].mxu0
  %v5015 = vadd.f32 %v4470, %v5014
  %v5016 = vpop.f32.mrb[0].mxu0
  %5017 = vmatprep.mubr.bf16.mxu0 0
  %5018 = vmatmul.mubr.bf16.gmra.mrb[0].mxu0 %v2116
  %v5019 = vpop.f32.mrb[0].mxu0
  %v5020 = vadd.f32 %v4475, %v5019
  %v5021 = vpop.f32.mrb[0].mxu0
  %v5022 = vpop.f32.mrb[0].mxu0
  %v5023 = vadd.f32 %v4478, %v5022
  %v5024 = vpop.f32.mrb[0].mxu0
  %5025 = vmatprep.mubr.bf16.mxu0 0
  %5026 = vmatmul.mubr.bf16.gmra.mrb[0].mxu0 %v2123
  %v5027 = vpop.f32.mrb[0].mxu0
  %v5028 = vadd.f32 %v4483, %v5027
  %v5029 = vpop.f32.mrb[0].mxu0
  %v5030 = vpop.f32.mrb[0].mxu0
  %v5031 = vadd.f32 %v4486, %v5030
  %v5032 = vpop.f32.mrb[0].mxu0
  %5033 = vmatprep.mubr.bf16.mxu0 0
  %5034 = vmatmul.mubr.bf16.gmra.mrb[0].mxu0 %v2130
  %v5035 = vpop.f32.mrb[0].mxu0
  %v5036 = vadd.f32 %v4491, %v5035
  %v5037 = vpop.f32.mrb[0].mxu0
  %v5038 = vpop.f32.mrb[0].mxu0
  %v5039 = vadd.f32 %v4494, %v5038
  %v5040 = vpop.f32.mrb[0].mxu0
  %5041 = vmatprep.mubr.bf16.mxu0 0
  %5042 = vmatmul.mubr.bf16.gmra.mrb[0].mxu0 %v2137
  %v5043 = vpop.f32.mrb[0].mxu0
  %v5044 = vadd.f32 %v4499, %v5043
  %v5045 = vpop.f32.mrb[0].mxu0
  %v5046 = vpop.f32.mrb[0].mxu0
  %v5047 = vadd.f32 %v4502, %v5046
  %v5048 = vpop.f32.mrb[0].mxu0
  %5049 = vmatprep.mubr.bf16.mxu0 0
  %5050 = vmatmul.mubr.bf16.gmra.mrb[0].mxu0 %v2144
  %v5051 = vpop.f32.mrb[0].mxu0
  %v5052 = vadd.f32 %v4507, %v5051
  %v5053 = vpop.f32.mrb[0].mxu0
  %v5054 = vpop.f32.mrb[0].mxu0
  %v5055 = vadd.f32 %v4510, %v5054
  %v5056 = vpop.f32.mrb[0].mxu0
  %5057 = vmatprep.mubr.bf16.mxu0 0
  %5058 = vmatmul.mubr.bf16.gmra.mrb[0].mxu0 %v2151
  %v5059 = vpop.f32.mrb[0].mxu0
  %v5060 = vadd.f32 %v4515, %v5059
  %v5061 = vpop.f32.mrb[0].mxu0
  %v5062 = vpop.f32.mrb[0].mxu0
  %v5063 = vadd.f32 %v4518, %v5062
  %v5064 = vpop.f32.mrb[0].mxu0
  %5065 = vmatprep.mubr.bf16.mxu0 0
  %5066 = vmatmul.mubr.bf16.gmra.mrb[0].mxu0 %v2158
  %v5067 = vpop.f32.mrb[0].mxu0
  %v5068 = vadd.f32 %v4523, %v5067
  %v5069 = vpop.f32.mrb[0].mxu0
  %v5070 = vpop.f32.mrb[0].mxu0
  %v5071 = vadd.f32 %v4526, %v5070
  %v5072 = vpop.f32.mrb[0].mxu0
  %5073 = vmatprep.mubr.bf16.mxu0 0
  %5074 = vmatmul.mubr.bf16.gmra.mrb[0].mxu0 %v2165
  %v5075 = vpop.f32.mrb[0].mxu0
  %v5076 = vadd.f32 %v4531, %v5075
  %v5077 = vpop.f32.mrb[0].mxu0
  %v5078 = vpop.f32.mrb[0].mxu0
  %v5079 = vadd.f32 %v4534, %v5078
  %v5080 = vpop.f32.mrb[0].mxu0
  %5081 = vmatprep.mubr.bf16.mxu0 0
  %5082 = vmatmul.mubr.bf16.gmra.mrb[0].mxu0 %v2172
  %v5083 = vpop.f32.mrb[0].mxu0
  %v5084 = vadd.f32 %v4539, %v5083
  %v5085 = vpop.f32.mrb[0].mxu0
  %v5086 = vpop.f32.mrb[0].mxu0
  %v5087 = vadd.f32 %v4542, %v5086
  %v5088 = vpop.f32.mrb[0].mxu0
  %5089 = vmatprep.mubr.bf16.mxu0 0
  %5090 = vmatmul.mubr.bf16.gmra.mrb[0].mxu0 %v2179
  %v5091 = vpop.f32.mrb[0].mxu0
  %v5092 = vadd.f32 %v4547, %v5091
  %v5093 = vpop.f32.mrb[0].mxu0
  %v5094 = vpop.f32.mrb[0].mxu0
  %v5095 = vadd.f32 %v4550, %v5094
  %v5096 = vpop.f32.mrb[0].mxu0
  %5097 = vmatprep.mubr.bf16.mxu0 0
  %5098 = vmatmul.mubr.bf16.gmra.mrb[0].mxu0 %v2186
  %v5099 = vpop.f32.mrb[0].mxu0
  %v5100 = vadd.f32 %v4555, %v5099
  %v5101 = vpop.f32.mrb[0].mxu0
  %v5102 = vpop.f32.mrb[0].mxu0
  %v5103 = vadd.f32 %v4558, %v5102
  %v5104 = vpop.f32.mrb[0].mxu0
  %5105 = vmatprep.mubr.bf16.mxu0 0
  %5106 = vmatmul.mubr.bf16.gmra.mrb[0].mxu0 %v2193
  %v5107 = vpop.f32.mrb[0].mxu0
  %v5108 = vadd.f32 %v4563, %v5107
  %v5109 = vpop.f32.mrb[0].mxu0
  %v5110 = vpop.f32.mrb[0].mxu0
  %v5111 = vadd.f32 %v4566, %v5110
  %v5112 = vpop.f32.mrb[0].mxu0
  %5113 = vmatprep.mubr.bf16.mxu0 0
  %5114 = vmatmul.mubr.bf16.gmra.mrb[0].mxu0 %v2200
  %v5115 = vpop.f32.mrb[0].mxu0
  %v5116 = vadd.f32 %v4571, %v5115
  %v5117 = vpop.f32.mrb[0].mxu0
  %v5118 = vpop.f32.mrb[0].mxu0
  %v5119 = vadd.f32 %v4574, %v5118
  %v5120 = vpop.f32.mrb[0].mxu0
  %5121 = vmatprep.mubr.bf16.mxu0 0
  %5122 = vmatmul.mubr.bf16.gmra.mrb[0].mxu0 %v2207
  %v5123 = vpop.f32.mrb[0].mxu0
  %v5124 = vadd.f32 %v4579, %v5123
  %v5125 = vpop.f32.mrb[0].mxu0
  %v5126 = vpop.f32.mrb[0].mxu0
  %v5127 = vadd.f32 %v4582, %v5126
  %v5128 = vpop.f32.mrb[0].mxu0
  %5129 = vmatprep.mubr.bf16.mxu0 0
  %5130 = vmatmul.mubr.bf16.gmra.mrb[0].mxu0 %v2214
  %v5131 = vpop.f32.mrb[0].mxu0
  %v5132 = vadd.f32 %v4587, %v5131
  %v5133 = vpop.f32.mrb[0].mxu0
  %v5134 = vpop.f32.mrb[0].mxu0
  %v5135 = vadd.f32 %v4590, %v5134
  %v5136 = vpop.f32.mrb[0].mxu0
  %5137 = vmatprep.mubr.bf16.mxu0 0
  %5138 = vmatmul.mubr.bf16.gmra.mrb[0].mxu0 %v2221
  %v5139 = vpop.f32.mrb[0].mxu0
  %v5140 = vadd.f32 %v4595, %v5139
  %v5141 = vpop.f32.mrb[0].mxu0
  %v5142 = vpop.f32.mrb[0].mxu0
  %v5143 = vadd.f32 %v4598, %v5142
  %v5144 = vpop.f32.mrb[0].mxu0
  %5145 = vmatprep.mubr.bf16.mxu0 0
  %5146 = vmatmul.mubr.bf16.gmra.mrb[0].mxu0 %v2228
  %v5147 = vpop.f32.mrb[0].mxu0
  %v5148 = vadd.f32 %v4603, %v5147
  %v5149 = vpop.f32.mrb[0].mxu0
  %v5150 = vpop.f32.mrb[0].mxu0
  %v5151 = vadd.f32 %v4606, %v5150
  %v5152 = vpop.f32.mrb[0].mxu0
  %5153 = vmatprep.mubr.bf16.mxu0 0
  %5154 = vmatmul.mubr.bf16.gmra.mrb[0].mxu0 %v2235
  %v5155 = vpop.f32.mrb[0].mxu0
  %v5156 = vadd.f32 %v4611, %v5155
  %v5157 = vpop.f32.mrb[0].mxu0
  %v5158 = vpop.f32.mrb[0].mxu0
  %v5159 = vadd.f32 %v4614, %v5158
  %v5160 = vpop.f32.mrb[0].mxu0
  %5161 = vmatprep.mubr.bf16.mxu0 0
  %5162 = vmatmul.mubr.bf16.gmra.mrb[0].mxu0 %v2242
  %v5163 = vpop.f32.mrb[0].mxu0
  %v5164 = vadd.f32 %v4619, %v5163
  %v5165 = vpop.f32.mrb[0].mxu0
  %v5166 = vpop.f32.mrb[0].mxu0
  %v5167 = vadd.f32 %v4622, %v5166
  %v5168 = vpop.f32.mrb[0].mxu0
  %5169 = vmatprep.mubr.bf16.mxu0 0
  %5170 = vmatmul.mubr.bf16.gmra.mrb[0].mxu0 %v2249
  %v5171 = vpop.f32.mrb[0].mxu0
  %v5172 = vadd.f32 %v4627, %v5171
  %v5173 = vpop.f32.mrb[0].mxu0
  %v5174 = vpop.f32.mrb[0].mxu0
  %v5175 = vadd.f32 %v4630, %v5174
  %v5176 = vpop.f32.mrb[0].mxu0
  %5177 = vmatprep.mubr.bf16.mxu0 0
  %5178 = vmatmul.mubr.bf16.gmra.mrb[0].mxu0 %v2256
  %v5179 = vpop.f32.mrb[0].mxu0
  %v5180 = vadd.f32 %v4635, %v5179
  %v5181 = vpop.f32.mrb[0].mxu0
  %v5182 = vpop.f32.mrb[0].mxu0
  %v5183 = vadd.f32 %v4638, %v5182
  %v5184 = vpop.f32.mrb[0].mxu0
  %5185 = vmatprep.mubr.bf16.mxu0 0
  %5186 = vmatmul.mubr.bf16.gmra.mrb[0].mxu0 %v2263
  %v5187 = vpop.f32.mrb[0].mxu0
  %v5188 = vadd.f32 %v4643, %v5187
  %v5189 = vpop.f32.mrb[0].mxu0
  %v5190 = vpop.f32.mrb[0].mxu0
  %v5191 = vadd.f32 %v4646, %v5190
  %v5192 = vpop.f32.mrb[0].mxu0
  %5193 = vmatprep.mubr.bf16.mxu0 0
  %5194 = vmatmul.mubr.bf16.gmra.mrb[0].mxu0 %v2270
  %v5195 = vpop.f32.mrb[0].mxu0
  %v5196 = vadd.f32 %v4651, %v5195
  %v5197 = vpop.f32.mrb[0].mxu0
  %v5198 = vpop.f32.mrb[0].mxu0
  %v5199 = vadd.f32 %v4654, %v5198
  %v5200 = vpop.f32.mrb[0].mxu0
  %5201 = vmatprep.mubr.bf16.mxu0 0
  %5202 = vmatmul.mubr.bf16.gmra.mrb[0].mxu0 %v2277
  %v5203 = vpop.f32.mrb[0].mxu0
  %v5204 = vadd.f32 %v4659, %v5203
  %v5205 = vpop.f32.mrb[0].mxu0
  %v5206 = vpop.f32.mrb[0].mxu0
  %v5207 = vadd.f32 %v4662, %v5206
  %v5208 = vpop.f32.mrb[0].mxu0
  %5209 = vmatprep.mubr.bf16.mxu0 0
  %5210 = vmatmul.mubr.bf16.gmra.mrb[0].mxu0 %v2284
  %v5211 = vpop.f32.mrb[0].mxu0
  %v5212 = vadd.f32 %v4667, %v5211
  %v5213 = vpop.f32.mrb[0].mxu0
  %v5214 = vpop.f32.mrb[0].mxu0
  %v5215 = vadd.f32 %v4670, %v5214
  %v5216 = vpop.f32.mrb[0].mxu0
  %5217 = vmatprep.mubr.bf16.mxu0 0
  %5218 = vmatmul.mubr.bf16.gmra.mrb[0].mxu0 %v2291
  %v5219 = vpop.f32.mrb[0].mxu0
  %v5220 = vadd.f32 %v4675, %v5219
  %v5221 = vpop.f32.mrb[0].mxu0
  %v5222 = vpop.f32.mrb[0].mxu0
  %v5223 = vadd.f32 %v4678, %v5222
  %v5224 = vpop.f32.mrb[0].mxu0
  %5225 = vmatprep.mubr.bf16.mxu0 0
  %5226 = vmatmul.mubr.bf16.gmra.mrb[0].mxu0 %v2298
  %v5227 = vpop.f32.mrb[0].mxu0
  %v5228 = vadd.f32 %v4683, %v5227
  %v5229 = vpop.f32.mrb[0].mxu0
  %v5230 = vpop.f32.mrb[0].mxu0
  %v5231 = vadd.f32 %v4686, %v5230
  %v5232 = vpop.f32.mrb[0].mxu0
  %5233 = vmatprep.mubr.bf16.mxu0 0
  %5234 = vmatmul.mubr.bf16.gmra.mrb[0].mxu0 %v2305
  %v5235 = vpop.f32.mrb[0].mxu0
  %v5236 = vadd.f32 %v4691, %v5235
  %v5237 = vpop.f32.mrb[0].mxu0
  %v5238 = vpop.f32.mrb[0].mxu0
  %v5239 = vadd.f32 %v4694, %v5238
  %v5240 = vpop.f32.mrb[0].mxu0
  %5241 = vmatprep.mubr.bf16.mxu0 0
  %5242 = vmatmul.mubr.bf16.gmra.mrb[0].mxu0 %v2312
  %v5243 = vpop.f32.mrb[0].mxu0
  %v5244 = vadd.f32 %v4699, %v5243
  %v5245 = vpop.f32.mrb[0].mxu0
  %v5246 = vpop.f32.mrb[0].mxu0
  %v5247 = vadd.f32 %v4702, %v5246
  %v5248 = vpop.f32.mrb[0].mxu0
  %5249 = vmatprep.mubr.bf16.mxu0 0
  %5250 = vmatmul.mubr.bf16.gmra.mrb[0].mxu0 %v2319
  %v5251 = vpop.f32.mrb[0].mxu0
  %v5252 = vadd.f32 %v4707, %v5251
  %v5253 = vpop.f32.mrb[0].mxu0
  %v5254 = vpop.f32.mrb[0].mxu0
  %v5255 = vadd.f32 %v4710, %v5254
  %v5256 = vpop.f32.mrb[0].mxu0
  %5257 = vmatprep.mubr.bf16.mxu0 0
  %5258 = vmatmul.mubr.bf16.gmra.mrb[0].mxu0 %v2326
  %v5259 = vpop.f32.mrb[0].mxu0
  %v5260 = vadd.f32 %v4715, %v5259
  %v5261 = vpop.f32.mrb[0].mxu0
  %v5262 = vpop.f32.mrb[0].mxu0
  %v5263 = vadd.f32 %v4718, %v5262
  %v5264 = vpop.f32.mrb[0].mxu0
  %5265 = vmatprep.mubr.bf16.mxu0 0
  %5266 = vmatmul.mubr.bf16.gmra.mrb[0].mxu0 %v2333
  %v5267 = vpop.f32.mrb[0].mxu0
  %v5268 = vadd.f32 %v4723, %v5267
  %v5269 = vpop.f32.mrb[0].mxu0
  %v5270 = vpop.f32.mrb[0].mxu0
  %v5271 = vadd.f32 %v4726, %v5270
  %v5272 = vpop.f32.mrb[0].mxu0
  %5273 = vmatprep.mubr.bf16.mxu0 0
  %5274 = vmatmul.mubr.bf16.gmra.mrb[0].mxu0 %v2340
  %v5275 = vpop.f32.mrb[0].mxu0
  %v5276 = vadd.f32 %v4731, %v5275
  %v5277 = vpop.f32.mrb[0].mxu0
  %v5278 = vpop.f32.mrb[0].mxu0
  %v5279 = vadd.f32 %v4734, %v5278
  %v5280 = vpop.f32.mrb[0].mxu0
  %5281 = vmatprep.mubr.bf16.mxu0 0
  %5282 = vmatmul.mubr.bf16.gmra.mrb[0].mxu0 %v2347
  %v5283 = vpop.f32.mrb[0].mxu0
  %v5284 = vadd.f32 %v4739, %v5283
  %v5285 = vpop.f32.mrb[0].mxu0
  %v5286 = vpop.f32.mrb[0].mxu0
  %v5287 = vadd.f32 %v4742, %v5286
  %v5288 = vpop.f32.mrb[0].mxu0
  %5289 = vmatprep.mubr.bf16.mxu0 0
  %5290 = vmatmul.mubr.bf16.gmra.mrb[0].mxu0 %v2354
  %v5291 = vpop.f32.mrb[0].mxu0
  %v5292 = vadd.f32 %v4747, %v5291
  %v5293 = vpop.f32.mrb[0].mxu0
  %v5294 = vpop.f32.mrb[0].mxu0
  %v5295 = vadd.f32 %v4750, %v5294
  %v5296 = vpop.f32.mrb[0].mxu0
  %5297 = vmatprep.mubr.bf16.mxu0 0
  %5298 = vmatmul.mubr.bf16.gmra.mrb[0].mxu0 %v2361
  %v5299 = vpop.f32.mrb[0].mxu0
  %v5300 = vadd.f32 %v4755, %v5299
  %v5301 = vpop.f32.mrb[0].mxu0
  %v5302 = vpop.f32.mrb[0].mxu0
  %v5303 = vadd.f32 %v4758, %v5302
  %v5304 = vpop.f32.mrb[0].mxu0
  %5305 = vmatprep.mubr.bf16.mxu0 0
  %5306 = vmatmul.mubr.bf16.gmra.mrb[0].mxu0 %v2368
  %v5307 = vpop.f32.mrb[0].mxu0
  %v5308 = vadd.f32 %v4763, %v5307
  %v5309 = vpop.f32.mrb[0].mxu0
  %v5310 = vpop.f32.mrb[0].mxu0
  %v5311 = vadd.f32 %v4766, %v5310
  %v5312 = vpop.f32.mrb[0].mxu0
  %5313 = vmatprep.mubr.bf16.mxu0 0
  %5314 = vmatmul.mubr.bf16.gmra.mrb[0].mxu0 %v2375
  %v5315 = vpop.f32.mrb[0].mxu0
  %v5316 = vadd.f32 %v4771, %v5315
  %v5317 = vpop.f32.mrb[0].mxu0
  %v5318 = vpop.f32.mrb[0].mxu0
  %v5319 = vadd.f32 %v4774, %v5318
  %v5320 = vpop.f32.mrb[0].mxu0
  %5321 = vmatprep.mubr.bf16.mxu0 0
  %5322 = vmatmul.mubr.bf16.gmra.mrb[0].mxu0 %v2382
  %v5323 = vpop.f32.mrb[0].mxu0
  %v5324 = vadd.f32 %v4779, %v5323
  %v5325 = vpop.f32.mrb[0].mxu0
  %v5326 = vpop.f32.mrb[0].mxu0
  %v5327 = vadd.f32 %v4782, %v5326
  %v5328 = vpop.f32.mrb[0].mxu0
  %5329 = vmatprep.mubr.bf16.mxu0 0
  %5330 = vmatmul.mubr.bf16.gmra.mrb[0].mxu0 %v2389
  %v5331 = vpop.f32.mrb[0].mxu0
  %v5332 = vadd.f32 %v4787, %v5331
  %v5333 = vpop.f32.mrb[0].mxu0
  %v5334 = vpop.f32.mrb[0].mxu0
  %v5335 = vadd.f32 %v4790, %v5334
  %v5336 = vpop.f32.mrb[0].mxu0
  %5337 = vmatprep.mubr.bf16.mxu0 0
  %5338 = vmatmul.mubr.bf16.gmra.mrb[0].mxu0 %v2396
  %v5339 = vpop.f32.mrb[0].mxu0
  %v5340 = vadd.f32 %v4795, %v5339
  %v5341 = vpop.f32.mrb[0].mxu0
  %v5342 = vpop.f32.mrb[0].mxu0
  %v5343 = vadd.f32 %v4798, %v5342
  %v5344 = vpop.f32.mrb[0].mxu0
  %5345 = vmatprep.mubr.bf16.mxu0 0
  %5346 = vmatmul.mubr.bf16.gmra.mrb[0].mxu0 %v2403
  %v5347 = vpop.f32.mrb[0].mxu0
  %v5348 = vadd.f32 %v4803, %v5347
  %v5349 = vpop.f32.mrb[0].mxu0
  %v5350 = vpop.f32.mrb[0].mxu0
  %v5351 = vadd.f32 %v4806, %v5350
  %v5352 = vpop.f32.mrb[0].mxu0
  %5353 = vmatprep.mubr.bf16.mxu0 0
  %5354 = vmatmul.mubr.bf16.gmra.mrb[0].mxu0 %v2410
  %v5355 = vpop.f32.mrb[0].mxu0
  %v5356 = vadd.f32 %v4811, %v5355
  %v5357 = vpop.f32.mrb[0].mxu0
  %v5358 = vpop.f32.mrb[0].mxu0
  %v5359 = vadd.f32 %v4814, %v5358
  %v5360 = vpop.f32.mrb[0].mxu0
  %5361 = vmatprep.mubr.bf16.mxu0 0
  %5362 = vmatmul.mubr.bf16.gmra.mrb[0].mxu0 %v2417
  %v5363 = vpop.f32.mrb[0].mxu0
  %v5364 = vadd.f32 %v4819, %v5363
  %v5365 = vpop.f32.mrb[0].mxu0
  %v5366 = vpop.f32.mrb[0].mxu0
  %v5367 = vadd.f32 %v4822, %v5366
  %v5368 = vpop.f32.mrb[0].mxu0
  %5369 = vmatprep.mubr.bf16.mxu0 0
  %5370 = vmatmul.mubr.bf16.gmra.mrb[0].mxu0 %v2424
  %v5371 = vpop.f32.mrb[0].mxu0
  %v5372 = vadd.f32 %v4827, %v5371
  %v5373 = vpop.f32.mrb[0].mxu0
  %v5374 = vpop.f32.mrb[0].mxu0
  %v5375 = vadd.f32 %v4830, %v5374
  %v5376 = vpop.f32.mrb[0].mxu0
  %5377 = vmatprep.mubr.bf16.mxu0 0
  %5378 = vmatmul.mubr.bf16.gmra.mrb[0].mxu0 %v2431
  %v5379 = vpop.f32.mrb[0].mxu0
  %v5380 = vadd.f32 %v4835, %v5379
  %v5381 = vpop.f32.mrb[0].mxu0
  %v5382 = vpop.f32.mrb[0].mxu0
  %v5383 = vadd.f32 %v4838, %v5382
  %v5384 = vpop.f32.mrb[0].mxu0
  %5385 = vmatprep.mubr.bf16.mxu0 0
  %5386 = vmatmul.mubr.bf16.gmra.mrb[0].mxu0 %v2438
  %v5387 = vpop.f32.mrb[0].mxu0
  %v5388 = vadd.f32 %v4843, %v5387
  %v5389 = vpop.f32.mrb[0].mxu0
  %v5390 = vpop.f32.mrb[0].mxu0
  %v5391 = vadd.f32 %v4846, %v5390
  %v5392 = vpop.f32.mrb[0].mxu0
  %5393 = vmatprep.mubr.bf16.mxu0 0
  %5394 = vmatmul.mubr.bf16.gmra.mrb[0].mxu0 %v2445
  %v5395 = vpop.f32.mrb[0].mxu0
  %v5396 = vadd.f32 %v4851, %v5395
  %v5397 = vpop.f32.mrb[0].mxu0
  %v5398 = vpop.f32.mrb[0].mxu0
  %v5399 = vadd.f32 %v4854, %v5398
  %v5400 = vpop.f32.mrb[0].mxu0
  %5401 = vmatprep.mubr.bf16.mxu0 0
  %5402 = vmatmul.mubr.bf16.gmra.mrb[0].mxu0 %v2452
  %v5403 = vpop.f32.mrb[0].mxu0
  %v5404 = vadd.f32 %v4859, %v5403
  %v5405 = vpop.f32.mrb[0].mxu0
  %v5406 = vpop.f32.mrb[0].mxu0
  %v5407 = vadd.f32 %v4862, %v5406
  %v5408 = vpop.f32.mrb[0].mxu0
  %5409 = vmatprep.mubr.bf16.mxu0 0
  %5410 = vmatmul.mubr.bf16.gmra.mrb[0].mxu0 %v2459
  %v5411 = vpop.f32.mrb[0].mxu0
  %v5412 = vadd.f32 %v4867, %v5411
  %v5413 = vpop.f32.mrb[0].mxu0
  %v5414 = vpop.f32.mrb[0].mxu0
  %v5415 = vadd.f32 %v4870, %v5414
  %v5416 = vpop.f32.mrb[0].mxu0
  %5417 = vmatprep.mubr.bf16.mxu0 0
  %5418 = vmatmul.mubr.bf16.gmra.mrb[0].mxu0 %v2466
  %v5419 = vpop.f32.mrb[0].mxu0
  %v5420 = vadd.f32 %v4875, %v5419
  %v5421 = vpop.f32.mrb[0].mxu0
  %v5422 = vpop.f32.mrb[0].mxu0
  %v5423 = vadd.f32 %v4878, %v5422
  %v5424 = vpop.f32.mrb[0].mxu0
  %5425 = vmatprep.mubr.bf16.mxu0 0
  %5426 = vmatmul.mubr.bf16.gmra.mrb[0].mxu0 %v2473
  %v5427 = vpop.f32.mrb[0].mxu0
  %v5428 = vadd.f32 %v4883, %v5427
  %v5429 = vpop.f32.mrb[0].mxu0
  %v5430 = vpop.f32.mrb[0].mxu0
  %v5431 = vadd.f32 %v4886, %v5430
  %v5432 = vpop.f32.mrb[0].mxu0
  %5433 = vmatprep.mubr.bf16.mxu0 0
  %5434 = vmatmul.mubr.bf16.gmra.mrb[0].mxu0 %v2480
  %v5435 = vpop.f32.mrb[0].mxu0
  %v5436 = vadd.f32 %v4891, %v5435
  %v5437 = vpop.f32.mrb[0].mxu0
  %v5438 = vpop.f32.mrb[0].mxu0
  %v5439 = vadd.f32 %v4894, %v5438
  %v5440 = vpop.f32.mrb[0].mxu0
  %5441 = vmatprep.mubr.bf16.mxu0 0
  %5442 = vmatmul.mubr.bf16.gmra.mrb[0].mxu0 %v2487
  %v5443 = vpop.f32.mrb[0].mxu0
  %v5444 = vadd.f32 %v4899, %v5443
  %v5445 = vpop.f32.mrb[0].mxu0
  %v5446 = vpop.f32.mrb[0].mxu0
  %v5447 = vadd.f32 %v4902, %v5446
  %v5448 = vpop.f32.mrb[0].mxu0
  %5449 = vmatprep.mubr.bf16.mxu0 0
  %5450 = vmatmul.mubr.bf16.gmra.mrb[0].mxu0 %v2494
  %v5451 = vpop.f32.mrb[0].mxu0
  %v5452 = vadd.f32 %v4907, %v5451
  %v5453 = vpop.f32.mrb[0].mxu0
  %v5454 = vpop.f32.mrb[0].mxu0
  %v5455 = vadd.f32 %v4910, %v5454
  %v5456 = vpop.f32.mrb[0].mxu0
  %5457 = vmatprep.mubr.bf16.mxu0 0
  %5458 = vmatmul.mubr.bf16.gmra.mrb[0].mxu0 %v2501
  %v5459 = vpop.f32.mrb[0].mxu0
  %v5460 = vadd.f32 %v4915, %v5459
  %v5461 = vpop.f32.mrb[0].mxu0
  %v5462 = vpop.f32.mrb[0].mxu0
  %v5463 = vadd.f32 %v4918, %v5462
  %v5464 = vpop.f32.mrb[0].mxu0
  %5465 = vdwg.mxu0
  %v5466 = vpack.c.bf16 %v4959, %v4956
  %v5467 = vpack.c.bf16 %v4967, %v4964
  %v5468 = vpack.c.bf16 %v4975, %v4972
  %v5469 = vpack.c.bf16 %v4983, %v4980
  %v5470 = vpack.c.bf16 %v4991, %v4988
  %v5471 = vpack.c.bf16 %v4999, %v4996
  %v5472 = vpack.c.bf16 %v5007, %v5004
  %v5473 = vpack.c.bf16 %v5015, %v5012
  %v5474 = vpack.c.bf16 %v5023, %v5020
  %v5475 = vpack.c.bf16 %v5031, %v5028
  %v5476 = vpack.c.bf16 %v5039, %v5036
  %v5477 = vpack.c.bf16 %v5047, %v5044
  %v5478 = vpack.c.bf16 %v5055, %v5052
  %v5479 = vpack.c.bf16 %v5063, %v5060
  %v5480 = vpack.c.bf16 %v5071, %v5068
  %v5481 = vpack.c.bf16 %v5079, %v5076
  %v5482 = vpack.c.bf16 %v5087, %v5084
  %v5483 = vpack.c.bf16 %v5095, %v5092
  %v5484 = vpack.c.bf16 %v5103, %v5100
  %v5485 = vpack.c.bf16 %v5111, %v5108
  %v5486 = vpack.c.bf16 %v5119, %v5116
  %v5487 = vpack.c.bf16 %v5127, %v5124
  %v5488 = vpack.c.bf16 %v5135, %v5132
  %v5489 = vpack.c.bf16 %v5143, %v5140
  %v5490 = vpack.c.bf16 %v5151, %v5148
  %v5491 = vpack.c.bf16 %v5159, %v5156
  %v5492 = vpack.c.bf16 %v5167, %v5164
  %v5493 = vpack.c.bf16 %v5175, %v5172
  %v5494 = vpack.c.bf16 %v5183, %v5180
  %v5495 = vpack.c.bf16 %v5191, %v5188
  %v5496 = vpack.c.bf16 %v5199, %v5196
  %v5497 = vpack.c.bf16 %v5207, %v5204
  %v5498 = vpack.c.bf16 %v5215, %v5212
  %v5499 = vpack.c.bf16 %v5223, %v5220
  %v5500 = vpack.c.bf16 %v5231, %v5228
  %v5501 = vpack.c.bf16 %v5239, %v5236
  %v5502 = vpack.c.bf16 %v5247, %v5244
  %v5503 = vpack.c.bf16 %v5255, %v5252
  %v5504 = vpack.c.bf16 %v5263, %v5260
  %v5505 = vpack.c.bf16 %v5271, %v5268
  %v5506 = vpack.c.bf16 %v5279, %v5276
  %v5507 = vpack.c.bf16 %v5287, %v5284
  %v5508 = vpack.c.bf16 %v5295, %v5292
  %v5509 = vpack.c.bf16 %v5303, %v5300
  %v5510 = vpack.c.bf16 %v5311, %v5308
  %v5511 = vpack.c.bf16 %v5319, %v5316
  %v5512 = vpack.c.bf16 %v5327, %v5324
  %v5513 = vpack.c.bf16 %v5335, %v5332
  %v5514 = vpack.c.bf16 %v5343, %v5340
  %v5515 = vpack.c.bf16 %v5351, %v5348
  %v5516 = vpack.c.bf16 %v5359, %v5356
  %v5517 = vpack.c.bf16 %v5367, %v5364
  %v5518 = vpack.c.bf16 %v5375, %v5372
  %v5519 = vpack.c.bf16 %v5383, %v5380
  %v5520 = vpack.c.bf16 %v5391, %v5388
  %v5521 = vpack.c.bf16 %v5399, %v5396
  %v5522 = vpack.c.bf16 %v5407, %v5404
  %v5523 = vpack.c.bf16 %v5415, %v5412
  %v5524 = vpack.c.bf16 %v5423, %v5420
  %v5525 = vpack.c.bf16 %v5431, %v5428
  %v5526 = vpack.c.bf16 %v5439, %v5436
  %v5527 = vpack.c.bf16 %v5447, %v5444
  %v5528 = vpack.c.bf16 %v5455, %v5452
  %v5529 = vpack.c.bf16 %v5463, %v5460
  %v5594 = vunpack.c.l.b16 %v5466
  %v5595 = vunpack.c.h.b16 %v5466
  %v5596 = vunpack.c.l.b16 %v5467
  %v5597 = vunpack.c.h.b16 %v5467
  %v5598 = vunpack.c.l.b16 %v5468
  %v5599 = vunpack.c.h.b16 %v5468
  %v5600 = vunpack.c.l.b16 %v5469
  %v5601 = vunpack.c.h.b16 %v5469
  %v5602 = vunpack.c.l.b16 %v5470
  %v5603 = vunpack.c.h.b16 %v5470
  %v5604 = vunpack.c.l.b16 %v5471
  %v5605 = vunpack.c.h.b16 %v5471
  %v5606 = vunpack.c.l.b16 %v5472
  %v5607 = vunpack.c.h.b16 %v5472
  %v5608 = vunpack.c.l.b16 %v5473
  %v5609 = vunpack.c.h.b16 %v5473
  %v5610 = vunpack.c.l.b16 %v5474
  %v5611 = vunpack.c.h.b16 %v5474
  %v5612 = vunpack.c.l.b16 %v5475
  %v5613 = vunpack.c.h.b16 %v5475
  %v5614 = vunpack.c.l.b16 %v5476
  %v5615 = vunpack.c.h.b16 %v5476
  %v5616 = vunpack.c.l.b16 %v5477
  %v5617 = vunpack.c.h.b16 %v5477
  %v5618 = vunpack.c.l.b16 %v5478
  %v5619 = vunpack.c.h.b16 %v5478
  %v5620 = vunpack.c.l.b16 %v5479
  %v5621 = vunpack.c.h.b16 %v5479
  %v5622 = vunpack.c.l.b16 %v5480
  %v5623 = vunpack.c.h.b16 %v5480
  %v5624 = vunpack.c.l.b16 %v5481
  %v5625 = vunpack.c.h.b16 %v5481
  %v5626 = vunpack.c.l.b16 %v5482
  %v5627 = vunpack.c.h.b16 %v5482
  %v5628 = vunpack.c.l.b16 %v5483
  %v5629 = vunpack.c.h.b16 %v5483
  %v5630 = vunpack.c.l.b16 %v5484
  %v5631 = vunpack.c.h.b16 %v5484
  %v5632 = vunpack.c.l.b16 %v5485
  %v5633 = vunpack.c.h.b16 %v5485
  %v5634 = vunpack.c.l.b16 %v5486
  %v5635 = vunpack.c.h.b16 %v5486
  %v5636 = vunpack.c.l.b16 %v5487
  %v5637 = vunpack.c.h.b16 %v5487
  %v5638 = vunpack.c.l.b16 %v5488
  %v5639 = vunpack.c.h.b16 %v5488
  %v5640 = vunpack.c.l.b16 %v5489
  %v5641 = vunpack.c.h.b16 %v5489
  %v5642 = vunpack.c.l.b16 %v5490
  %v5643 = vunpack.c.h.b16 %v5490
  %v5644 = vunpack.c.l.b16 %v5491
  %v5645 = vunpack.c.h.b16 %v5491
  %v5646 = vunpack.c.l.b16 %v5492
  %v5647 = vunpack.c.h.b16 %v5492
  %v5648 = vunpack.c.l.b16 %v5493
  %v5649 = vunpack.c.h.b16 %v5493
  %v5650 = vunpack.c.l.b16 %v5494
  %v5651 = vunpack.c.h.b16 %v5494
  %v5652 = vunpack.c.l.b16 %v5495
  %v5653 = vunpack.c.h.b16 %v5495
  %v5654 = vunpack.c.l.b16 %v5496
  %v5655 = vunpack.c.h.b16 %v5496
  %v5656 = vunpack.c.l.b16 %v5497
  %v5657 = vunpack.c.h.b16 %v5497
  %v5658 = vunpack.c.l.b16 %v5498
  %v5659 = vunpack.c.h.b16 %v5498
  %v5660 = vunpack.c.l.b16 %v5499
  %v5661 = vunpack.c.h.b16 %v5499
  %v5662 = vunpack.c.l.b16 %v5500
  %v5663 = vunpack.c.h.b16 %v5500
  %v5664 = vunpack.c.l.b16 %v5501
  %v5665 = vunpack.c.h.b16 %v5501
  %v5666 = vunpack.c.l.b16 %v5502
  %v5667 = vunpack.c.h.b16 %v5502
  %v5668 = vunpack.c.l.b16 %v5503
  %v5669 = vunpack.c.h.b16 %v5503
  %v5670 = vunpack.c.l.b16 %v5504
  %v5671 = vunpack.c.h.b16 %v5504
  %v5672 = vunpack.c.l.b16 %v5505
  %v5673 = vunpack.c.h.b16 %v5505
  %v5674 = vunpack.c.l.b16 %v5506
  %v5675 = vunpack.c.h.b16 %v5506
  %v5676 = vunpack.c.l.b16 %v5507
  %v5677 = vunpack.c.h.b16 %v5507
  %v5678 = vunpack.c.l.b16 %v5508
  %v5679 = vunpack.c.h.b16 %v5508
  %v5680 = vunpack.c.l.b16 %v5509
  %v5681 = vunpack.c.h.b16 %v5509
  %v5682 = vunpack.c.l.b16 %v5510
  %v5683 = vunpack.c.h.b16 %v5510
  %v5684 = vunpack.c.l.b16 %v5511
  %v5685 = vunpack.c.h.b16 %v5511
  %v5686 = vunpack.c.l.b16 %v5512
  %v5687 = vunpack.c.h.b16 %v5512
  %v5688 = vunpack.c.l.b16 %v5513
  %v5689 = vunpack.c.h.b16 %v5513
  %v5690 = vunpack.c.l.b16 %v5514
  %v5691 = vunpack.c.h.b16 %v5514
  %v5692 = vunpack.c.l.b16 %v5515
  %v5693 = vunpack.c.h.b16 %v5515
  %v5694 = vunpack.c.l.b16 %v5516
  %v5695 = vunpack.c.h.b16 %v5516
  %v5696 = vunpack.c.l.b16 %v5517
  %v5697 = vunpack.c.h.b16 %v5517
  %v5698 = vunpack.c.l.b16 %v5518
  %v5699 = vunpack.c.h.b16 %v5518
  %v5700 = vunpack.c.l.b16 %v5519
  %v5701 = vunpack.c.h.b16 %v5519
  %v5702 = vunpack.c.l.b16 %v5520
  %v5703 = vunpack.c.h.b16 %v5520
  %v5704 = vunpack.c.l.b16 %v5521
  %v5705 = vunpack.c.h.b16 %v5521
  %v5706 = vunpack.c.l.b16 %v5522
  %v5707 = vunpack.c.h.b16 %v5522
  %v5708 = vunpack.c.l.b16 %v5523
  %v5709 = vunpack.c.h.b16 %v5523
  %v5710 = vunpack.c.l.b16 %v5524
  %v5711 = vunpack.c.h.b16 %v5524
  %v5712 = vunpack.c.l.b16 %v5525
  %v5713 = vunpack.c.h.b16 %v5525
  %v5714 = vunpack.c.l.b16 %v5526
  %v5715 = vunpack.c.h.b16 %v5526
  %v5716 = vunpack.c.l.b16 %v5527
  %v5717 = vunpack.c.h.b16 %v5527
  %v5718 = vunpack.c.l.b16 %v5528
  %v5719 = vunpack.c.h.b16 %v5528
  %v5720 = vunpack.c.l.b16 %v5529
  %v5721 = vunpack.c.h.b16 %v5529
  %v5722 = vpack.c.b16 %v5594, %v5594
  %v5723 = vpack.c.b16 %v5595, %v5595
  %v5724 = vpack.c.b16 %v5596, %v5596
  %v5725 = vpack.c.b16 %v5597, %v5597
  %v5726 = vpack.c.b16 %v5598, %v5598
  %v5727 = vpack.c.b16 %v5599, %v5599
  %v5728 = vpack.c.b16 %v5600, %v5600
  %v5729 = vpack.c.b16 %v5601, %v5601
  %v5730 = vpack.c.b16 %v5602, %v5602
  %v5731 = vpack.c.b16 %v5603, %v5603
  %v5732 = vpack.c.b16 %v5604, %v5604
  %v5733 = vpack.c.b16 %v5605, %v5605
  %v5734 = vpack.c.b16 %v5606, %v5606
  %v5735 = vpack.c.b16 %v5607, %v5607
  %v5736 = vpack.c.b16 %v5608, %v5608
  %v5737 = vpack.c.b16 %v5609, %v5609
  %v5738 = vpack.c.b16 %v5610, %v5610
  %v5739 = vpack.c.b16 %v5611, %v5611
  %v5740 = vpack.c.b16 %v5612, %v5612
  %v5741 = vpack.c.b16 %v5613, %v5613
  %v5742 = vpack.c.b16 %v5614, %v5614
  %v5743 = vpack.c.b16 %v5615, %v5615
  %v5744 = vpack.c.b16 %v5616, %v5616
  %v5745 = vpack.c.b16 %v5617, %v5617
  %v5746 = vpack.c.b16 %v5618, %v5618
  %v5747 = vpack.c.b16 %v5619, %v5619
  %v5748 = vpack.c.b16 %v5620, %v5620
  %v5749 = vpack.c.b16 %v5621, %v5621
  %v5750 = vpack.c.b16 %v5622, %v5622
  %v5751 = vpack.c.b16 %v5623, %v5623
  %v5752 = vpack.c.b16 %v5624, %v5624
  %v5753 = vpack.c.b16 %v5625, %v5625
  %v5754 = vpack.c.b16 %v5626, %v5626
  %v5755 = vpack.c.b16 %v5627, %v5627
  %v5756 = vpack.c.b16 %v5628, %v5628
  %v5757 = vpack.c.b16 %v5629, %v5629
  %v5758 = vpack.c.b16 %v5630, %v5630
  %v5759 = vpack.c.b16 %v5631, %v5631
  %v5760 = vpack.c.b16 %v5632, %v5632
  %v5761 = vpack.c.b16 %v5633, %v5633
  %v5762 = vpack.c.b16 %v5634, %v5634
  %v5763 = vpack.c.b16 %v5635, %v5635
  %v5764 = vpack.c.b16 %v5636, %v5636
  %v5765 = vpack.c.b16 %v5637, %v5637
  %v5766 = vpack.c.b16 %v5638, %v5638
  %v5767 = vpack.c.b16 %v5639, %v5639
  %v5768 = vpack.c.b16 %v5640, %v5640
  %v5769 = vpack.c.b16 %v5641, %v5641
  %v5770 = vpack.c.b16 %v5642, %v5642
  %v5771 = vpack.c.b16 %v5643, %v5643
  %v5772 = vpack.c.b16 %v5644, %v5644
  %v5773 = vpack.c.b16 %v5645, %v5645
  %v5774 = vpack.c.b16 %v5646, %v5646
  %v5775 = vpack.c.b16 %v5647, %v5647
  %v5776 = vpack.c.b16 %v5648, %v5648
  %v5777 = vpack.c.b16 %v5649, %v5649
  %v5778 = vpack.c.b16 %v5650, %v5650
  %v5779 = vpack.c.b16 %v5651, %v5651
  %v5780 = vpack.c.b16 %v5652, %v5652
  %v5781 = vpack.c.b16 %v5653, %v5653
  %v5782 = vpack.c.b16 %v5654, %v5654
  %v5783 = vpack.c.b16 %v5655, %v5655
  %v5784 = vpack.c.b16 %v5656, %v5656
  %v5785 = vpack.c.b16 %v5657, %v5657
  %v5786 = vpack.c.b16 %v5658, %v5658
  %v5787 = vpack.c.b16 %v5659, %v5659
  %v5788 = vpack.c.b16 %v5660, %v5660
  %v5789 = vpack.c.b16 %v5661, %v5661
  %v5790 = vpack.c.b16 %v5662, %v5662
  %v5791 = vpack.c.b16 %v5663, %v5663
  %v5792 = vpack.c.b16 %v5664, %v5664
  %v5793 = vpack.c.b16 %v5665, %v5665
  %v5794 = vpack.c.b16 %v5666, %v5666
  %v5795 = vpack.c.b16 %v5667, %v5667
  %v5796 = vpack.c.b16 %v5668, %v5668
  %v5797 = vpack.c.b16 %v5669, %v5669
  %v5798 = vpack.c.b16 %v5670, %v5670
  %v5799 = vpack.c.b16 %v5671, %v5671
  %v5800 = vpack.c.b16 %v5672, %v5672
  %v5801 = vpack.c.b16 %v5673, %v5673
  %v5802 = vpack.c.b16 %v5674, %v5674
  %v5803 = vpack.c.b16 %v5675, %v5675
  %v5804 = vpack.c.b16 %v5676, %v5676
  %v5805 = vpack.c.b16 %v5677, %v5677
  %v5806 = vpack.c.b16 %v5678, %v5678
  %v5807 = vpack.c.b16 %v5679, %v5679
  %v5808 = vpack.c.b16 %v5680, %v5680
  %v5809 = vpack.c.b16 %v5681, %v5681
  %v5810 = vpack.c.b16 %v5682, %v5682
  %v5811 = vpack.c.b16 %v5683, %v5683
  %v5812 = vpack.c.b16 %v5684, %v5684
  %v5813 = vpack.c.b16 %v5685, %v5685
  %v5814 = vpack.c.b16 %v5686, %v5686
  %v5815 = vpack.c.b16 %v5687, %v5687
  %v5816 = vpack.c.b16 %v5688, %v5688
  %v5817 = vpack.c.b16 %v5689, %v5689
  %v5818 = vpack.c.b16 %v5690, %v5690
  %v5819 = vpack.c.b16 %v5691, %v5691
  %v5820 = vpack.c.b16 %v5692, %v5692
  %v5821 = vpack.c.b16 %v5693, %v5693
  %v5822 = vpack.c.b16 %v5694, %v5694
  %v5823 = vpack.c.b16 %v5695, %v5695
  %v5824 = vpack.c.b16 %v5696, %v5696
  %v5825 = vpack.c.b16 %v5697, %v5697
  %v5826 = vpack.c.b16 %v5698, %v5698
  %v5827 = vpack.c.b16 %v5699, %v5699
  %v5828 = vpack.c.b16 %v5700, %v5700
  %v5829 = vpack.c.b16 %v5701, %v5701
  %v5830 = vpack.c.b16 %v5702, %v5702
  %v5831 = vpack.c.b16 %v5703, %v5703
  %v5832 = vpack.c.b16 %v5704, %v5704
  %v5833 = vpack.c.b16 %v5705, %v5705
  %v5834 = vpack.c.b16 %v5706, %v5706
  %v5835 = vpack.c.b16 %v5707, %v5707
  %v5836 = vpack.c.b16 %v5708, %v5708
  %v5837 = vpack.c.b16 %v5709, %v5709
  %v5838 = vpack.c.b16 %v5710, %v5710
  %v5839 = vpack.c.b16 %v5711, %v5711
  %v5840 = vpack.c.b16 %v5712, %v5712
  %v5841 = vpack.c.b16 %v5713, %v5713
  %v5842 = vpack.c.b16 %v5714, %v5714
  %v5843 = vpack.c.b16 %v5715, %v5715
  %v5844 = vpack.c.b16 %v5716, %v5716
  %v5845 = vpack.c.b16 %v5717, %v5717
  %v5846 = vpack.c.b16 %v5718, %v5718
  %v5847 = vpack.c.b16 %v5719, %v5719
  %v5848 = vpack.c.b16 %v5720, %v5720
  %v5849 = vpack.c.b16 %v5721, %v5721
  %5978 = vst [vmem:[%s3] sm:$0xf] %v5722
  %5979 = vst [vmem:[%s3 + $0x4] sm:$0xf] %v5723
  %5980 = vst [vmem:[%s3 + $0x8] sm:$0xf] %v5724
  %5981 = vst [vmem:[%s3 + $0xc] sm:$0xf] %v5725
  %5982 = vst [vmem:[%s3 + $0x10] sm:$0xf] %v5726
  %5983 = vst [vmem:[%s3 + $0x14] sm:$0xf] %v5727
  %5984 = vst [vmem:[%s3 + $0x18] sm:$0xf] %v5728
  %5985 = vst [vmem:[%s3 + $0x1c] sm:$0xf] %v5729
  %5986 = vst [vmem:[%s3 + $0x20] sm:$0xf] %v5730
  %5987 = vst [vmem:[%s3 + $0x24] sm:$0xf] %v5731
  %5988 = vst [vmem:[%s3 + $0x28] sm:$0xf] %v5732
  %5989 = vst [vmem:[%s3 + $0x2c] sm:$0xf] %v5733
  %5990 = vst [vmem:[%s3 + $0x30] sm:$0xf] %v5734
  %5991 = vst [vmem:[%s3 + $0x34] sm:$0xf] %v5735
  %5992 = vst [vmem:[%s3 + $0x38] sm:$0xf] %v5736
  %5993 = vst [vmem:[%s3 + $0x3c] sm:$0xf] %v5737
  %5994 = vst [vmem:[%s3 + $0x40] sm:$0xf] %v5738
  %5995 = vst [vmem:[%s3 + $0x44] sm:$0xf] %v5739
  %5996 = vst [vmem:[%s3 + $0x48] sm:$0xf] %v5740
  %5997 = vst [vmem:[%s3 + $0x4c] sm:$0xf] %v5741
  %5998 = vst [vmem:[%s3 + $0x50] sm:$0xf] %v5742
  %5999 = vst [vmem:[%s3 + $0x54] sm:$0xf] %v5743
  %6000 = vst [vmem:[%s3 + $0x58] sm:$0xf] %v5744
  %6001 = vst [vmem:[%s3 + $0x5c] sm:$0xf] %v5745
  %6002 = vst [vmem:[%s3 + $0x60] sm:$0xf] %v5746
  %6003 = vst [vmem:[%s3 + $0x64] sm:$0xf] %v5747
  %6004 = vst [vmem:[%s3 + $0x68] sm:$0xf] %v5748
  %6005 = vst [vmem:[%s3 + $0x6c] sm:$0xf] %v5749
  %6006 = vst [vmem:[%s3 + $0x70] sm:$0xf] %v5750
  %6007 = vst [vmem:[%s3 + $0x74] sm:$0xf] %v5751
  %6008 = vst [vmem:[%s3 + $0x78] sm:$0xf] %v5752
  %6009 = vst [vmem:[%s3 + $0x7c] sm:$0xf] %v5753
  %6010 = vst [vmem:[%s3 + $0x80] sm:$0xf] %v5754
  %6011 = vst [vmem:[%s3 + $0x84] sm:$0xf] %v5755
  %6012 = vst [vmem:[%s3 + $0x88] sm:$0xf] %v5756
  %6013 = vst [vmem:[%s3 + $0x8c] sm:$0xf] %v5757
  %6014 = vst [vmem:[%s3 + $0x90] sm:$0xf] %v5758
  %6015 = vst [vmem:[%s3 + $0x94] sm:$0xf] %v5759
  %6016 = vst [vmem:[%s3 + $0x98] sm:$0xf] %v5760
  %6017 = vst [vmem:[%s3 + $0x9c] sm:$0xf] %v5761
  %6018 = vst [vmem:[%s3 + $0xa0] sm:$0xf] %v5762
  %6019 = vst [vmem:[%s3 + $0xa4] sm:$0xf] %v5763
  %6020 = vst [vmem:[%s3 + $0xa8] sm:$0xf] %v5764
  %6021 = vst [vmem:[%s3 + $0xac] sm:$0xf] %v5765
  %6022 = vst [vmem:[%s3 + $0xb0] sm:$0xf] %v5766
  %6023 = vst [vmem:[%s3 + $0xb4] sm:$0xf] %v5767
  %6024 = vst [vmem:[%s3 + $0xb8] sm:$0xf] %v5768
  %6025 = vst [vmem:[%s3 + $0xbc] sm:$0xf] %v5769
  %6026 = vst [vmem:[%s3 + $0xc0] sm:$0xf] %v5770
  %6027 = vst [vmem:[%s3 + $0xc4] sm:$0xf] %v5771
  %6028 = vst [vmem:[%s3 + $0xc8] sm:$0xf] %v5772
  %6029 = vst [vmem:[%s3 + $0xcc] sm:$0xf] %v5773
  %6030 = vst [vmem:[%s3 + $0xd0] sm:$0xf] %v5774
  %6031 = vst [vmem:[%s3 + $0xd4] sm:$0xf] %v5775
  %6032 = vst [vmem:[%s3 + $0xd8] sm:$0xf] %v5776
  %6033 = vst [vmem:[%s3 + $0xdc] sm:$0xf] %v5777
  %6034 = vst [vmem:[%s3 + $0xe0] sm:$0xf] %v5778
  %6035 = vst [vmem:[%s3 + $0xe4] sm:$0xf] %v5779
  %6036 = vst [vmem:[%s3 + $0xe8] sm:$0xf] %v5780
  %6037 = vst [vmem:[%s3 + $0xec] sm:$0xf] %v5781
  %6038 = vst [vmem:[%s3 + $0xf0] sm:$0xf] %v5782
  %6039 = vst [vmem:[%s3 + $0xf4] sm:$0xf] %v5783
  %6040 = vst [vmem:[%s3 + $0xf8] sm:$0xf] %v5784
  %6041 = vst [vmem:[%s3 + $0xfc] sm:$0xf] %v5785
  %6042 = vst [vmem:[%s3 + $0x100] sm:$0xf] %v5786
  %6043 = vst [vmem:[%s3 + $0x104] sm:$0xf] %v5787
  %6044 = vst [vmem:[%s3 + $0x108] sm:$0xf] %v5788
  %6045 = vst [vmem:[%s3 + $0x10c] sm:$0xf] %v5789
  %6046 = vst [vmem:[%s3 + $0x110] sm:$0xf] %v5790
  %6047 = vst [vmem:[%s3 + $0x114] sm:$0xf] %v5791
  %6048 = vst [vmem:[%s3 + $0x118] sm:$0xf] %v5792
  %6049 = vst [vmem:[%s3 + $0x11c] sm:$0xf] %v5793
  %6050 = vst [vmem:[%s3 + $0x120] sm:$0xf] %v5794
  %6051 = vst [vmem:[%s3 + $0x124] sm:$0xf] %v5795
  %6052 = vst [vmem:[%s3 + $0x128] sm:$0xf] %v5796
  %6053 = vst [vmem:[%s3 + $0x12c] sm:$0xf] %v5797
  %6054 = vst [vmem:[%s3 + $0x130] sm:$0xf] %v5798
  %6055 = vst [vmem:[%s3 + $0x134] sm:$0xf] %v5799
  %6056 = vst [vmem:[%s3 + $0x138] sm:$0xf] %v5800
  %6057 = vst [vmem:[%s3 + $0x13c] sm:$0xf] %v5801
  %6058 = vst [vmem:[%s3 + $0x140] sm:$0xf] %v5802
  %6059 = vst [vmem:[%s3 + $0x144] sm:$0xf] %v5803
  %6060 = vst [vmem:[%s3 + $0x148] sm:$0xf] %v5804
  %6061 = vst [vmem:[%s3 + $0x14c] sm:$0xf] %v5805
  %6062 = vst [vmem:[%s3 + $0x150] sm:$0xf] %v5806
  %6063 = vst [vmem:[%s3 + $0x154] sm:$0xf] %v5807
  %6064 = vst [vmem:[%s3 + $0x158] sm:$0xf] %v5808
  %6065 = vst [vmem:[%s3 + $0x15c] sm:$0xf] %v5809
  %6066 = vst [vmem:[%s3 + $0x160] sm:$0xf] %v5810
  %6067 = vst [vmem:[%s3 + $0x164] sm:$0xf] %v5811
  %6068 = vst [vmem:[%s3 + $0x168] sm:$0xf] %v5812
  %6069 = vst [vmem:[%s3 + $0x16c] sm:$0xf] %v5813
  %6070 = vst [vmem:[%s3 + $0x170] sm:$0xf] %v5814
  %6071 = vst [vmem:[%s3 + $0x174] sm:$0xf] %v5815
  %6072 = vst [vmem:[%s3 + $0x178] sm:$0xf] %v5816
  %6073 = vst [vmem:[%s3 + $0x17c] sm:$0xf] %v5817
  %6074 = vst [vmem:[%s3 + $0x180] sm:$0xf] %v5818
  %6075 = vst [vmem:[%s3 + $0x184] sm:$0xf] %v5819
  %6076 = vst [vmem:[%s3 + $0x188] sm:$0xf] %v5820
  %6077 = vst [vmem:[%s3 + $0x18c] sm:$0xf] %v5821
  %6078 = vst [vmem:[%s3 + $0x190] sm:$0xf] %v5822
  %6079 = vst [vmem:[%s3 + $0x194] sm:$0xf] %v5823
  %6080 = vst [vmem:[%s3 + $0x198] sm:$0xf] %v5824
  %6081 = vst [vmem:[%s3 + $0x19c] sm:$0xf] %v5825
  %6082 = vst [vmem:[%s3 + $0x1a0] sm:$0xf] %v5826
  %6083 = vst [vmem:[%s3 + $0x1a4] sm:$0xf] %v5827
  %6084 = vst [vmem:[%s3 + $0x1a8] sm:$0xf] %v5828
  %6085 = vst [vmem:[%s3 + $0x1ac] sm:$0xf] %v5829
  %6086 = vst [vmem:[%s3 + $0x1b0] sm:$0xf] %v5830
  %6087 = vst [vmem:[%s3 + $0x1b4] sm:$0xf] %v5831
  %6088 = vst [vmem:[%s3 + $0x1b8] sm:$0xf] %v5832
  %6089 = vst [vmem:[%s3 + $0x1bc] sm:$0xf] %v5833
  %6090 = vst [vmem:[%s3 + $0x1c0] sm:$0xf] %v5834
  %6091 = vst [vmem:[%s3 + $0x1c4] sm:$0xf] %v5835
  %6092 = vst [vmem:[%s3 + $0x1c8] sm:$0xf] %v5836
  %6093 = vst [vmem:[%s3 + $0x1cc] sm:$0xf] %v5837
  %6094 = vst [vmem:[%s3 + $0x1d0] sm:$0xf] %v5838
  %6095 = vst [vmem:[%s3 + $0x1d4] sm:$0xf] %v5839
  %6096 = vst [vmem:[%s3 + $0x1d8] sm:$0xf] %v5840
  %6097 = vst [vmem:[%s3 + $0x1dc] sm:$0xf] %v5841
  %6098 = vst [vmem:[%s3 + $0x1e0] sm:$0xf] %v5842
  %6099 = vst [vmem:[%s3 + $0x1e4] sm:$0xf] %v5843
  %6100 = vst [vmem:[%s3 + $0x1e8] sm:$0xf] %v5844
  %6101 = vst [vmem:[%s3 + $0x1ec] sm:$0xf] %v5845
  %6102 = vst [vmem:[%s3 + $0x1f0] sm:$0xf] %v5846
  %6103 = vst [vmem:[%s3 + $0x1f4] sm:$0xf] %v5847
  %6104 = vst [vmem:[%s3 + $0x1f8] sm:$0xf] %v5848
  %6105 = vst [vmem:[%s3 + $0x1fc] sm:$0xf] %v5849
  // Predicated region
  $region14: #{net_forward.11} parent=0 // pred_check
    _
  $region15: #{net_forward.11} parent=0 // pred_check_branch
    %6107 = sbr.rel (0) target = $region17
  $region16: #{net_forward.11} parent=0 // pred_region
    _
  $region17: #{net_forward.11} parent=0 // pred_fallthru
    _
  // Predicated region
  $region18: #{net_forward.11} parent=0 // pred_check
    _
  $region19: #{net_forward.11} parent=0 // pred_check_branch
    %6109 = sbr.rel (0) target = $region21
  $region20: #{net_forward.11} parent=0 // pred_region
    _
  $region21: #{net_forward.11} parent=0 // pred_fallthru
    _

</llo_original>
